<compile_context>
chip_gen: v7x
topology: tpu7x:2x2x1
jax: 0.10.0
libtpu: 0.0.40
codegen_flags: <defaults>
</compile_context>

<pallas_src>
import jax
import jax.numpy as jnp
from jax import lax
from jax.experimental import pallas as pl
from jax.experimental.pallas import tpu as pltpu

N, C, D, H, W = 2, 4, 8, 8, 8
CP = 8                               # packed sublanes = N * C (2 batches x 4 chans)
assert N * C == CP
Dp, Hp, Wp = D + 2, H + 2, W + 2     # physical zero padding (conv padding=1)
LP = Dp * Hp * Wp                    # 1000 padded-flat spatial positions
LI = ((LP + 127) // 128) * 128       # 1024 lane-dense interior width
HALO = 128                           # lane halo (>= max |tap offset| = 111)
LBUF = HALO + LI + HALO              # 1280 lanes per scratch buffer row

# Flat lane offset of each 3x3x3 tap, enumerated (kd, kh, kw) to match the
# (27, C, C) weight packing w[kd*9 + kh*3 + kw, c_in, c_out].
OFFSETS = [(kd - 1) * Hp * Wp + (kh - 1) * Wp + (kw - 1)
           for kd in range(3) for kh in range(3) for kw in range(3)]


def _conv27(w, src_ref):
    """27-tap conv as 27 lane-shifted (CP,CP)@(CP,LI) bf16 MXU matmuls, f32 acc."""
    off0 = OFFSETS[0]
    acc = jnp.dot(w[0], src_ref[:, HALO + off0:HALO + off0 + LI],
                  preferred_element_type=jnp.float32)
    for j in range(1, 27):
        off = OFFSETS[j]
        acc = acc + jnp.dot(w[j], src_ref[:, HALO + off:HALO + off + LI],
                            preferred_element_type=jnp.float32)
    return acc


def resblock_kernel(x_ref, mask_ref, w1_ref, b1_ref, w2_ref, b2_ref,
                    w3_ref, b3_ref, out_ref, xscr_ref, hscr_ref):
    # Zero only the 128-lane halos of the two bf16 scratch buffers (the
    # interiors are fully overwritten below).
    zhalo = jnp.zeros((CP, HALO), jnp.bfloat16)
    xscr_ref[:, :HALO] = zhalo
    xscr_ref[:, HALO + LI:] = zhalo
    hscr_ref[:, :HALO] = zhalo
    hscr_ref[:, HALO + LI:] = zhalo

    # Build the haloed bf16 x buffer in-kernel; keep the f32 copy for the
    # residual add.
    x_f32 = x_ref[...]                                    # (CP, LI) f32
    xscr_ref[:, HALO:HALO + LI] = x_f32.astype(jnp.bfloat16)

    mask = mask_ref[...]                                  # (1, LI) f32

    # ---- conv1: 3x3x3, padding=1, then ReLU (f32 epilogue) ----
    w1 = w1_ref[...]                                      # (27, CP, CP) bf16
    acc = _conv27(w1, xscr_ref)
    h1 = jnp.maximum(acc + b1_ref[...], 0.0) * mask       # zero pad/tail positions
    hscr_ref[:, HALO:HALO + LI] = h1.astype(jnp.bfloat16)

    # ---- conv2: 3x3x3, padding=1, then ReLU (f32 epilogue) ----
    w2 = w2_ref[...]
    acc = _conv27(w2, hscr_ref)
    h2 = jnp.maximum(acc + b2_ref[...], 0.0)

    # ---- conv3: 1x1x1 + f32 residual (lane-dense (CP, LI) f32 store) ----
    out_ref[...] = (jnp.dot(w3_ref[...], h2.astype(jnp.bfloat16),
                            preferred_element_type=jnp.float32)
                    + b3_ref[...] + x_f32)


@jax.jit
def resblock_pallas(x_ncdhw, params):
    w1, b1, w2, b2, w3, b3 = params

    # --- pack x: NCDHW -> physically zero-padded, flattened volume on lanes,
    # batch packed into the channel sublanes (rows 0-3 = n0, rows 4-7 = n1).
    xp = jnp.pad(x_ncdhw.astype(jnp.float32),
                 ((0, 0), (0, 0), (1, 1), (1, 1), (1, 1)))       # (N,C,Dp,Hp,Wp)
    xp = xp.reshape(N, C, LP)
    xp = jnp.pad(xp, ((0, 0), (0, 0), (0, LI - LP)))             # lane tail zeros
    xpk = xp.reshape(N * C, LI)                                  # (CP, LI) f32

    # Interior mask over the LI lane positions (1 for real interior voxels,
    # 0 on physical-padding / tail positions).  Shared by both batch halves.
    q = jnp.arange(LI)
    a, b, c = q // (Hp * Wp), (q // Wp) % Hp, q % Wp
    mask = (((q < LP) & (a >= 1) & (a <= D) & (b >= 1) & (b <= H)
             & (c >= 1) & (c <= W)).astype(jnp.float32).reshape(1, LI))

    # Weights: transpose to (c_out, c_in), embed block-diagonally into (CP,CP)
    # (so the two batch halves never mix), cast to bf16.  Biases stay f32 and
    # are tiled for both halves as (CP, 1) columns.
    def pack_w(wk):
        wt = jnp.swapaxes(wk, -1, -2).astype(jnp.float32)        # (..., c_out, c_in)
        wb = jnp.zeros(wt.shape[:-2] + (CP, CP), jnp.float32)
        wb = wb.at[..., 0:C, 0:C].set(wt)
        wb = wb.at[..., C:2 * C, C:2 * C].set(wt)
        return wb.astype(jnp.bfloat16)

    def pack_b(bk):
        bcol = bk.reshape(C, 1).astype(jnp.float32)
        return jnp.concatenate([bcol, bcol], axis=0)             # (CP, 1)

    w1t, w2t, w3t = pack_w(w1), pack_w(w2), pack_w(w3)
    b1t, b2t, b3t = pack_b(b1), pack_b(b2), pack_b(b3)

    out = pl.pallas_call(
        resblock_kernel,
        out_shape=jax.ShapeDtypeStruct((CP, LI), jnp.float32),
        grid_spec=pltpu.PrefetchScalarGridSpec(
            num_scalar_prefetch=0,
            grid=(1,),
            in_specs=[
                pl.BlockSpec((CP, LI), lambda i: (0, 0)),         # x (packed, f32)
                pl.BlockSpec((1, LI), lambda i: (0, 0)),          # interior mask
                pl.BlockSpec((27, CP, CP), lambda i: (0, 0, 0)),  # w1^T block-diag bf16
                pl.BlockSpec((CP, 1), lambda i: (0, 0)),          # b1
                pl.BlockSpec((27, CP, CP), lambda i: (0, 0, 0)),  # w2^T block-diag bf16
                pl.BlockSpec((CP, 1), lambda i: (0, 0)),          # b2
                pl.BlockSpec((CP, CP), lambda i: (0, 0)),         # w3^T block-diag bf16
                pl.BlockSpec((CP, 1), lambda i: (0, 0)),          # b3
            ],
            out_specs=pl.BlockSpec((CP, LI), lambda i: (0, 0)),
            scratch_shapes=[pltpu.VMEM((CP, LBUF), jnp.bfloat16),   # haloed x (bf16)
                            pltpu.VMEM((CP, LBUF), jnp.bfloat16)],  # haloed h1 (bf16)
        ),
        compiler_params=pltpu.CompilerParams(
            dimension_semantics=("arbitrary",)),
    )(xpk, mask, w1t, b1t, w2t, b2t, w3t, b3t)

    # Unpack: drop the lane tail, un-flatten, strip the physical spatial
    # padding, split the sublane-packed batches -> NCDHW.  (Fused under jit.)
    out = out[:, :LP].reshape(N, C, Dp, Hp, Wp)[:, :, 1:1 + D, 1:1 + H, 1:1 + W]
    return out


def ref_resblock(x, params):
    """Pure-JAX reference (same math as torch ResBlock.forward)."""
    w1, b1, w2, b2, w3, b3 = params

    def conv(x, wk, b, ksize):
        if ksize == 3:
            rhs = jnp.transpose(wk.reshape(3, 3, 3, C, C), (4, 3, 0, 1, 2))  # OIDHW
            pad = [(1, 1)] * 3
        else:
            rhs = jnp.transpose(wk.reshape(1, 1, 1, C, C), (4, 3, 0, 1, 2))
            pad = [(0, 0)] * 3
        y = lax.conv_general_dilated(
            x, rhs, window_strides=(1, 1, 1), padding=pad,
            dimension_numbers=('NCDHW', 'OIDHW', 'NCDHW'))
        return y + b.reshape(1, C, 1, 1, 1)

    h = jax.nn.relu(conv(x, w1, b1, 3))
    h = jax.nn.relu(conv(h, w2, b2, 3))
    return conv(h, w3, b3, 1) + x


if __name__ == "__main__":
    key = jax.random.PRNGKey(0)
    k = jax.random.split(key, 7)
    x = jax.random.normal(k[0], (N, C, D, H, W), jnp.float32)

    # Deterministic synthetic parameters.
    # w{1,2}[kd*9+kh*3+kw, ci, co] corresponds to torch conv.weight[co, ci, kd, kh, kw].
    w1 = (jax.random.normal(k[1], (3, 3, 3, C, C), jnp.float32) * 0.1).reshape(27, C, C)
    b1 = jax.random.normal(k[2], (1, C), jnp.float32) * 0.1
    w2 = (jax.random.normal(k[3], (3, 3, 3, C, C), jnp.float32) * 0.1).reshape(27, C, C)
    b2 = jax.random.normal(k[4], (1, C), jnp.float32) * 0.1
    w3 = jax.random.normal(k[5], (C, C), jnp.float32) * 0.1   # 1x1x1 conv, (Cin, Cout)
    b3 = jax.random.normal(k[6], (1, C), jnp.float32) * 0.1
    params = (w1, b1, w2, b2, w3, b3)

    y = resblock_pallas(x, params)
    y = jax.block_until_ready(y)

    y_ref = ref_resblock(x, params)
    err = float(jnp.max(jnp.abs(y - y_ref)))
    assert err < 1e-2, f"mismatch vs reference: max abs err = {err}"
    print("KERNEL_OK")
</pallas_src>

<mosaic_0001>
module attributes {stable_mosaic.version = 11 : i64} {
  func.func @resblock_kernel(%arg0: i32, %arg1: memref<8x1024xf32, #tpu.memory_space<vmem>>, %arg2: memref<1x1024xf32, #tpu.memory_space<vmem>>, %arg3: memref<27x8x8xbf16, #tpu.memory_space<vmem>>, %arg4: memref<8x1xf32, #tpu.memory_space<vmem>>, %arg5: memref<27x8x8xbf16, #tpu.memory_space<vmem>>, %arg6: memref<8x1xf32, #tpu.memory_space<vmem>>, %arg7: memref<8x8xbf16, #tpu.memory_space<vmem>>, %arg8: memref<8x1xf32, #tpu.memory_space<vmem>>, %arg9: memref<8x1024xf32, #tpu.memory_space<vmem>>, %arg10: memref<8x1280xbf16, #tpu.memory_space<vmem>>, %arg11: memref<8x1280xbf16, #tpu.memory_space<vmem>>) attributes {dimension_semantics = [#tpu.dimension_semantics<arbitrary>], iteration_bounds = array<i64: 1>, scalar_prefetch = 0 : i64, scratch_operands = 2 : i64, tpu.core_type = #tpu.core_type<tc>, window_params = [{pipeline_mode = #tpu.pipeline_mode<synchronous>, transform_indices = @transform_0, window_bounds = array<i64: 8, 1024>}, {pipeline_mode = #tpu.pipeline_mode<synchronous>, transform_indices = @transform_1, window_bounds = array<i64: 1, 1024>}, {pipeline_mode = #tpu.pipeline_mode<synchronous>, transform_indices = @transform_2, window_bounds = array<i64: 27, 8, 8>}, {pipeline_mode = #tpu.pipeline_mode<synchronous>, transform_indices = @transform_3, window_bounds = array<i64: 8, 1>}, {pipeline_mode = #tpu.pipeline_mode<synchronous>, transform_indices = @transform_4, window_bounds = array<i64: 27, 8, 8>}, {pipeline_mode = #tpu.pipeline_mode<synchronous>, transform_indices = @transform_5, window_bounds = array<i64: 8, 1>}, {pipeline_mode = #tpu.pipeline_mode<synchronous>, transform_indices = @transform_6, window_bounds = array<i64: 8, 8>}, {pipeline_mode = #tpu.pipeline_mode<synchronous>, transform_indices = @transform_7, window_bounds = array<i64: 8, 1>}, {pipeline_mode = #tpu.pipeline_mode<synchronous>, transform_indices = @transform_8, window_bounds = array<i64: 8, 1024>}]} {
    %cst = arith.constant 0.000000e+00 : bf16
    %0 = vector.broadcast %cst : bf16 to vector<8x128xbf16>
    %c0 = arith.constant 0 : index
    %c0_0 = arith.constant 0 : index
    %1 = vector.load %arg10[%c0, %c0_0] : memref<8x1280xbf16, #tpu.memory_space<vmem>>, vector<8x128xbf16>
    tpu.vector_store %arg10[%c0, %c0_0], %0 {strides = array<i32>} : memref<8x1280xbf16, #tpu.memory_space<vmem>>, vector<8x128xbf16>,
    %c0_1 = arith.constant 0 : index
    %c1152 = arith.constant 1152 : index
    %2 = vector.load %arg10[%c0_1, %c1152] : memref<8x1280xbf16, #tpu.memory_space<vmem>>, vector<8x128xbf16>
    tpu.vector_store %arg10[%c0_1, %c1152], %0 {strides = array<i32>} : memref<8x1280xbf16, #tpu.memory_space<vmem>>, vector<8x128xbf16>,
    %c0_2 = arith.constant 0 : index
    %c0_3 = arith.constant 0 : index
    %3 = vector.load %arg11[%c0_2, %c0_3] : memref<8x1280xbf16, #tpu.memory_space<vmem>>, vector<8x128xbf16>
    tpu.vector_store %arg11[%c0_2, %c0_3], %0 {strides = array<i32>} : memref<8x1280xbf16, #tpu.memory_space<vmem>>, vector<8x128xbf16>,
    %c0_4 = arith.constant 0 : index
    %c1152_5 = arith.constant 1152 : index
    %4 = vector.load %arg11[%c0_4, %c1152_5] : memref<8x1280xbf16, #tpu.memory_space<vmem>>, vector<8x128xbf16>
    tpu.vector_store %arg11[%c0_4, %c1152_5], %0 {strides = array<i32>} : memref<8x1280xbf16, #tpu.memory_space<vmem>>, vector<8x128xbf16>,
    %c0_6 = arith.constant 0 : index
    %c0_7 = arith.constant 0 : index
    %5 = vector.load %arg1[%c0_6, %c0_7] : memref<8x1024xf32, #tpu.memory_space<vmem>>, vector<8x1024xf32>
    %6 = arith.truncf %5 : vector<8x1024xf32> to vector<8x1024xbf16>
    %c0_8 = arith.constant 0 : index
    %c128 = arith.constant 128 : index
    %7 = vector.load %arg10[%c0_8, %c128] : memref<8x1280xbf16, #tpu.memory_space<vmem>>, vector<8x1024xbf16>
    tpu.vector_store %arg10[%c0_8, %c128], %6 {strides = array<i32>} : memref<8x1280xbf16, #tpu.memory_space<vmem>>, vector<8x1024xbf16>,
    %c0_9 = arith.constant 0 : index
    %c0_10 = arith.constant 0 : index
    %8 = vector.load %arg2[%c0_9, %c0_10] : memref<1x1024xf32, #tpu.memory_space<vmem>>, vector<1x1024xf32>
    %c0_11 = arith.constant 0 : index
    %c0_12 = arith.constant 0 : index
    %c0_13 = arith.constant 0 : index
    %9 = vector.load %arg3[%c0_11, %c0_12, %c0_13] : memref<27x8x8xbf16, #tpu.memory_space<vmem>>, vector<27x8x8xbf16>
    %10 = vector.extract_strided_slice %9 {offsets = [0, 0, 0], sizes = [1, 8, 8], strides = [1, 1, 1]} : vector<27x8x8xbf16> to vector<1x8x8xbf16>
    %11 = vector.shape_cast %10 : vector<1x8x8xbf16> to vector<8x8xbf16>
    %c0_14 = arith.constant 0 : index
    %c17 = arith.constant 17 : index
    %12 = vector.load %arg10[%c0_14, %c17] : memref<8x1280xbf16, #tpu.memory_space<vmem>>, vector<8x1024xbf16>
    %cst_15 = arith.constant dense<0.000000e+00> : vector<8x1024xf32>
    %13 = tpu.matmul %11, %12, %cst_15 {dimension_numbers = #tpu.dot_dimension_numbers<[1], [0], [0], [1], [0, 0, 1, 1], [], []>} : vector<8x8xbf16>, vector<8x1024xbf16>, vector<8x1024xf32> -> vector<8x1024xf32>
    %14 = vector.extract_strided_slice %9 {offsets = [1, 0, 0], sizes = [1, 8, 8], strides = [1, 1, 1]} : vector<27x8x8xbf16> to vector<1x8x8xbf16>
    %15 = vector.shape_cast %14 : vector<1x8x8xbf16> to vector<8x8xbf16>
    %c0_16 = arith.constant 0 : index
    %c18 = arith.constant 18 : index
    %16 = vector.load %arg10[%c0_16, %c18] : memref<8x1280xbf16, #tpu.memory_space<vmem>>, vector<8x1024xbf16>
    %cst_17 = arith.constant dense<0.000000e+00> : vector<8x1024xf32>
    %17 = tpu.matmul %15, %16, %cst_17 {dimension_numbers = #tpu.dot_dimension_numbers<[1], [0], [0], [1], [0, 0, 1, 1], [], []>} : vector<8x8xbf16>, vector<8x1024xbf16>, vector<8x1024xf32> -> vector<8x1024xf32>
    %18 = arith.addf %13, %17 : vector<8x1024xf32>
    %19 = vector.extract_strided_slice %9 {offsets = [2, 0, 0], sizes = [1, 8, 8], strides = [1, 1, 1]} : vector<27x8x8xbf16> to vector<1x8x8xbf16>
    %20 = vector.shape_cast %19 : vector<1x8x8xbf16> to vector<8x8xbf16>
    %c0_18 = arith.constant 0 : index
    %c19 = arith.constant 19 : index
    %21 = vector.load %arg10[%c0_18, %c19] : memref<8x1280xbf16, #tpu.memory_space<vmem>>, vector<8x1024xbf16>
    %cst_19 = arith.constant dense<0.000000e+00> : vector<8x1024xf32>
    %22 = tpu.matmul %20, %21, %cst_19 {dimension_numbers = #tpu.dot_dimension_numbers<[1], [0], [0], [1], [0, 0, 1, 1], [], []>} : vector<8x8xbf16>, vector<8x1024xbf16>, vector<8x1024xf32> -> vector<8x1024xf32>
    %23 = arith.addf %18, %22 : vector<8x1024xf32>
    %24 = vector.extract_strided_slice %9 {offsets = [3, 0, 0], sizes = [1, 8, 8], strides = [1, 1, 1]} : vector<27x8x8xbf16> to vector<1x8x8xbf16>
    %25 = vector.shape_cast %24 : vector<1x8x8xbf16> to vector<8x8xbf16>
    %c0_20 = arith.constant 0 : index
    %c27 = arith.constant 27 : index
    %26 = vector.load %arg10[%c0_20, %c27] : memref<8x1280xbf16, #tpu.memory_space<vmem>>, vector<8x1024xbf16>
    %cst_21 = arith.constant dense<0.000000e+00> : vector<8x1024xf32>
    %27 = tpu.matmul %25, %26, %cst_21 {dimension_numbers = #tpu.dot_dimension_numbers<[1], [0], [0], [1], [0, 0, 1, 1], [], []>} : vector<8x8xbf16>, vector<8x1024xbf16>, vector<8x1024xf32> -> vector<8x1024xf32>
    %28 = arith.addf %23, %27 : vector<8x1024xf32>
    %29 = vector.extract_strided_slice %9 {offsets = [4, 0, 0], sizes = [1, 8, 8], strides = [1, 1, 1]} : vector<27x8x8xbf16> to vector<1x8x8xbf16>
    %30 = vector.shape_cast %29 : vector<1x8x8xbf16> to vector<8x8xbf16>
    %c0_22 = arith.constant 0 : index
    %c28 = arith.constant 28 : index
    %31 = vector.load %arg10[%c0_22, %c28] : memref<8x1280xbf16, #tpu.memory_space<vmem>>, vector<8x1024xbf16>
    %cst_23 = arith.constant dense<0.000000e+00> : vector<8x1024xf32>
    %32 = tpu.matmul %30, %31, %cst_23 {dimension_numbers = #tpu.dot_dimension_numbers<[1], [0], [0], [1], [0, 0, 1, 1], [], []>} : vector<8x8xbf16>, vector<8x1024xbf16>, vector<8x1024xf32> -> vector<8x1024xf32>
    %33 = arith.addf %28, %32 : vector<8x1024xf32>
    %34 = vector.extract_strided_slice %9 {offsets = [5, 0, 0], sizes = [1, 8, 8], strides = [1, 1, 1]} : vector<27x8x8xbf16> to vector<1x8x8xbf16>
    %35 = vector.shape_cast %34 : vector<1x8x8xbf16> to vector<8x8xbf16>
    %c0_24 = arith.constant 0 : index
    %c29 = arith.constant 29 : index
    %36 = vector.load %arg10[%c0_24, %c29] : memref<8x1280xbf16, #tpu.memory_space<vmem>>, vector<8x1024xbf16>
    %cst_25 = arith.constant dense<0.000000e+00> : vector<8x1024xf32>
    %37 = tpu.matmul %35, %36, %cst_25 {dimension_numbers = #tpu.dot_dimension_numbers<[1], [0], [0], [1], [0, 0, 1, 1], [], []>} : vector<8x8xbf16>, vector<8x1024xbf16>, vector<8x1024xf32> -> vector<8x1024xf32>
    %38 = arith.addf %33, %37 : vector<8x1024xf32>
    %39 = vector.extract_strided_slice %9 {offsets = [6, 0, 0], sizes = [1, 8, 8], strides = [1, 1, 1]} : vector<27x8x8xbf16> to vector<1x8x8xbf16>
    %40 = vector.shape_cast %39 : vector<1x8x8xbf16> to vector<8x8xbf16>
    %c0_26 = arith.constant 0 : index
    %c37 = arith.constant 37 : index
    %41 = vector.load %arg10[%c0_26, %c37] : memref<8x1280xbf16, #tpu.memory_space<vmem>>, vector<8x1024xbf16>
    %cst_27 = arith.constant dense<0.000000e+00> : vector<8x1024xf32>
    %42 = tpu.matmul %40, %41, %cst_27 {dimension_numbers = #tpu.dot_dimension_numbers<[1], [0], [0], [1], [0, 0, 1, 1], [], []>} : vector<8x8xbf16>, vector<8x1024xbf16>, vector<8x1024xf32> -> vector<8x1024xf32>
    %43 = arith.addf %38, %42 : vector<8x1024xf32>
    %44 = vector.extract_strided_slice %9 {offsets = [7, 0, 0], sizes = [1, 8, 8], strides = [1, 1, 1]} : vector<27x8x8xbf16> to vector<1x8x8xbf16>
    %45 = vector.shape_cast %44 : vector<1x8x8xbf16> to vector<8x8xbf16>
    %c0_28 = arith.constant 0 : index
    %c38 = arith.constant 38 : index
    %46 = vector.load %arg10[%c0_28, %c38] : memref<8x1280xbf16, #tpu.memory_space<vmem>>, vector<8x1024xbf16>
    %cst_29 = arith.constant dense<0.000000e+00> : vector<8x1024xf32>
    %47 = tpu.matmul %45, %46, %cst_29 {dimension_numbers = #tpu.dot_dimension_numbers<[1], [0], [0], [1], [0, 0, 1, 1], [], []>} : vector<8x8xbf16>, vector<8x1024xbf16>, vector<8x1024xf32> -> vector<8x1024xf32>
    %48 = arith.addf %43, %47 : vector<8x1024xf32>
    %49 = vector.extract_strided_slice %9 {offsets = [8, 0, 0], sizes = [1, 8, 8], strides = [1, 1, 1]} : vector<27x8x8xbf16> to vector<1x8x8xbf16>
    %50 = vector.shape_cast %49 : vector<1x8x8xbf16> to vector<8x8xbf16>
    %c0_30 = arith.constant 0 : index
    %c39 = arith.constant 39 : index
    %51 = vector.load %arg10[%c0_30, %c39] : memref<8x1280xbf16, #tpu.memory_space<vmem>>, vector<8x1024xbf16>
    %cst_31 = arith.constant dense<0.000000e+00> : vector<8x1024xf32>
    %52 = tpu.matmul %50, %51, %cst_31 {dimension_numbers = #tpu.dot_dimension_numbers<[1], [0], [0], [1], [0, 0, 1, 1], [], []>} : vector<8x8xbf16>, vector<8x1024xbf16>, vector<8x1024xf32> -> vector<8x1024xf32>
    %53 = arith.addf %48, %52 : vector<8x1024xf32>
    %54 = vector.extract_strided_slice %9 {offsets = [9, 0, 0], sizes = [1, 8, 8], strides = [1, 1, 1]} : vector<27x8x8xbf16> to vector<1x8x8xbf16>
    %55 = vector.shape_cast %54 : vector<1x8x8xbf16> to vector<8x8xbf16>
    %c0_32 = arith.constant 0 : index
    %c117 = arith.constant 117 : index
    %56 = vector.load %arg10[%c0_32, %c117] : memref<8x1280xbf16, #tpu.memory_space<vmem>>, vector<8x1024xbf16>
    %cst_33 = arith.constant dense<0.000000e+00> : vector<8x1024xf32>
    %57 = tpu.matmul %55, %56, %cst_33 {dimension_numbers = #tpu.dot_dimension_numbers<[1], [0], [0], [1], [0, 0, 1, 1], [], []>} : vector<8x8xbf16>, vector<8x1024xbf16>, vector<8x1024xf32> -> vector<8x1024xf32>
    %58 = arith.addf %53, %57 : vector<8x1024xf32>
    %59 = vector.extract_strided_slice %9 {offsets = [10, 0, 0], sizes = [1, 8, 8], strides = [1, 1, 1]} : vector<27x8x8xbf16> to vector<1x8x8xbf16>
    %60 = vector.shape_cast %59 : vector<1x8x8xbf16> to vector<8x8xbf16>
    %c0_34 = arith.constant 0 : index
    %c118 = arith.constant 118 : index
    %61 = vector.load %arg10[%c0_34, %c118] : memref<8x1280xbf16, #tpu.memory_space<vmem>>, vector<8x1024xbf16>
    %cst_35 = arith.constant dense<0.000000e+00> : vector<8x1024xf32>
    %62 = tpu.matmul %60, %61, %cst_35 {dimension_numbers = #tpu.dot_dimension_numbers<[1], [0], [0], [1], [0, 0, 1, 1], [], []>} : vector<8x8xbf16>, vector<8x1024xbf16>, vector<8x1024xf32> -> vector<8x1024xf32>
    %63 = arith.addf %58, %62 : vector<8x1024xf32>
    %64 = vector.extract_strided_slice %9 {offsets = [11, 0, 0], sizes = [1, 8, 8], strides = [1, 1, 1]} : vector<27x8x8xbf16> to vector<1x8x8xbf16>
    %65 = vector.shape_cast %64 : vector<1x8x8xbf16> to vector<8x8xbf16>
    %c0_36 = arith.constant 0 : index
    %c119 = arith.constant 119 : index
    %66 = vector.load %arg10[%c0_36, %c119] : memref<8x1280xbf16, #tpu.memory_space<vmem>>, vector<8x1024xbf16>
    %cst_37 = arith.constant dense<0.000000e+00> : vector<8x1024xf32>
    %67 = tpu.matmul %65, %66, %cst_37 {dimension_numbers = #tpu.dot_dimension_numbers<[1], [0], [0], [1], [0, 0, 1, 1], [], []>} : vector<8x8xbf16>, vector<8x1024xbf16>, vector<8x1024xf32> -> vector<8x1024xf32>
    %68 = arith.addf %63, %67 : vector<8x1024xf32>
    %69 = vector.extract_strided_slice %9 {offsets = [12, 0, 0], sizes = [1, 8, 8], strides = [1, 1, 1]} : vector<27x8x8xbf16> to vector<1x8x8xbf16>
    %70 = vector.shape_cast %69 : vector<1x8x8xbf16> to vector<8x8xbf16>
    %c0_38 = arith.constant 0 : index
    %c127 = arith.constant 127 : index
    %71 = vector.load %arg10[%c0_38, %c127] : memref<8x1280xbf16, #tpu.memory_space<vmem>>, vector<8x1024xbf16>
    %cst_39 = arith.constant dense<0.000000e+00> : vector<8x1024xf32>
    %72 = tpu.matmul %70, %71, %cst_39 {dimension_numbers = #tpu.dot_dimension_numbers<[1], [0], [0], [1], [0, 0, 1, 1], [], []>} : vector<8x8xbf16>, vector<8x1024xbf16>, vector<8x1024xf32> -> vector<8x1024xf32>
    %73 = arith.addf %68, %72 : vector<8x1024xf32>
    %74 = vector.extract_strided_slice %9 {offsets = [13, 0, 0], sizes = [1, 8, 8], strides = [1, 1, 1]} : vector<27x8x8xbf16> to vector<1x8x8xbf16>
    %75 = vector.shape_cast %74 : vector<1x8x8xbf16> to vector<8x8xbf16>
    %c0_40 = arith.constant 0 : index
    %c128_41 = arith.constant 128 : index
    %76 = vector.load %arg10[%c0_40, %c128_41] : memref<8x1280xbf16, #tpu.memory_space<vmem>>, vector<8x1024xbf16>
    %cst_42 = arith.constant dense<0.000000e+00> : vector<8x1024xf32>
    %77 = tpu.matmul %75, %76, %cst_42 {dimension_numbers = #tpu.dot_dimension_numbers<[1], [0], [0], [1], [0, 0, 1, 1], [], []>} : vector<8x8xbf16>, vector<8x1024xbf16>, vector<8x1024xf32> -> vector<8x1024xf32>
    %78 = arith.addf %73, %77 : vector<8x1024xf32>
    %79 = vector.extract_strided_slice %9 {offsets = [14, 0, 0], sizes = [1, 8, 8], strides = [1, 1, 1]} : vector<27x8x8xbf16> to vector<1x8x8xbf16>
    %80 = vector.shape_cast %79 : vector<1x8x8xbf16> to vector<8x8xbf16>
    %c0_43 = arith.constant 0 : index
    %c129 = arith.constant 129 : index
    %81 = vector.load %arg10[%c0_43, %c129] : memref<8x1280xbf16, #tpu.memory_space<vmem>>, vector<8x1024xbf16>
    %cst_44 = arith.constant dense<0.000000e+00> : vector<8x1024xf32>
    %82 = tpu.matmul %80, %81, %cst_44 {dimension_numbers = #tpu.dot_dimension_numbers<[1], [0], [0], [1], [0, 0, 1, 1], [], []>} : vector<8x8xbf16>, vector<8x1024xbf16>, vector<8x1024xf32> -> vector<8x1024xf32>
    %83 = arith.addf %78, %82 : vector<8x1024xf32>
    %84 = vector.extract_strided_slice %9 {offsets = [15, 0, 0], sizes = [1, 8, 8], strides = [1, 1, 1]} : vector<27x8x8xbf16> to vector<1x8x8xbf16>
    %85 = vector.shape_cast %84 : vector<1x8x8xbf16> to vector<8x8xbf16>
    %c0_45 = arith.constant 0 : index
    %c137 = arith.constant 137 : index
    %86 = vector.load %arg10[%c0_45, %c137] : memref<8x1280xbf16, #tpu.memory_space<vmem>>, vector<8x1024xbf16>
    %cst_46 = arith.constant dense<0.000000e+00> : vector<8x1024xf32>
    %87 = tpu.matmul %85, %86, %cst_46 {dimension_numbers = #tpu.dot_dimension_numbers<[1], [0], [0], [1], [0, 0, 1, 1], [], []>} : vector<8x8xbf16>, vector<8x1024xbf16>, vector<8x1024xf32> -> vector<8x1024xf32>
    %88 = arith.addf %83, %87 : vector<8x1024xf32>
    %89 = vector.extract_strided_slice %9 {offsets = [16, 0, 0], sizes = [1, 8, 8], strides = [1, 1, 1]} : vector<27x8x8xbf16> to vector<1x8x8xbf16>
    %90 = vector.shape_cast %89 : vector<1x8x8xbf16> to vector<8x8xbf16>
    %c0_47 = arith.constant 0 : index
    %c138 = arith.constant 138 : index
    %91 = vector.load %arg10[%c0_47, %c138] : memref<8x1280xbf16, #tpu.memory_space<vmem>>, vector<8x1024xbf16>
    %cst_48 = arith.constant dense<0.000000e+00> : vector<8x1024xf32>
    %92 = tpu.matmul %90, %91, %cst_48 {dimension_numbers = #tpu.dot_dimension_numbers<[1], [0], [0], [1], [0, 0, 1, 1], [], []>} : vector<8x8xbf16>, vector<8x1024xbf16>, vector<8x1024xf32> -> vector<8x1024xf32>
    %93 = arith.addf %88, %92 : vector<8x1024xf32>
    %94 = vector.extract_strided_slice %9 {offsets = [17, 0, 0], sizes = [1, 8, 8], strides = [1, 1, 1]} : vector<27x8x8xbf16> to vector<1x8x8xbf16>
    %95 = vector.shape_cast %94 : vector<1x8x8xbf16> to vector<8x8xbf16>
    %c0_49 = arith.constant 0 : index
    %c139 = arith.constant 139 : index
    %96 = vector.load %arg10[%c0_49, %c139] : memref<8x1280xbf16, #tpu.memory_space<vmem>>, vector<8x1024xbf16>
    %cst_50 = arith.constant dense<0.000000e+00> : vector<8x1024xf32>
    %97 = tpu.matmul %95, %96, %cst_50 {dimension_numbers = #tpu.dot_dimension_numbers<[1], [0], [0], [1], [0, 0, 1, 1], [], []>} : vector<8x8xbf16>, vector<8x1024xbf16>, vector<8x1024xf32> -> vector<8x1024xf32>
    %98 = arith.addf %93, %97 : vector<8x1024xf32>
    %99 = vector.extract_strided_slice %9 {offsets = [18, 0, 0], sizes = [1, 8, 8], strides = [1, 1, 1]} : vector<27x8x8xbf16> to vector<1x8x8xbf16>
    %100 = vector.shape_cast %99 : vector<1x8x8xbf16> to vector<8x8xbf16>
    %c0_51 = arith.constant 0 : index
    %c217 = arith.constant 217 : index
    %101 = vector.load %arg10[%c0_51, %c217] : memref<8x1280xbf16, #tpu.memory_space<vmem>>, vector<8x1024xbf16>
    %cst_52 = arith.constant dense<0.000000e+00> : vector<8x1024xf32>
    %102 = tpu.matmul %100, %101, %cst_52 {dimension_numbers = #tpu.dot_dimension_numbers<[1], [0], [0], [1], [0, 0, 1, 1], [], []>} : vector<8x8xbf16>, vector<8x1024xbf16>, vector<8x1024xf32> -> vector<8x1024xf32>
    %103 = arith.addf %98, %102 : vector<8x1024xf32>
    %104 = vector.extract_strided_slice %9 {offsets = [19, 0, 0], sizes = [1, 8, 8], strides = [1, 1, 1]} : vector<27x8x8xbf16> to vector<1x8x8xbf16>
    %105 = vector.shape_cast %104 : vector<1x8x8xbf16> to vector<8x8xbf16>
    %c0_53 = arith.constant 0 : index
    %c218 = arith.constant 218 : index
    %106 = vector.load %arg10[%c0_53, %c218] : memref<8x1280xbf16, #tpu.memory_space<vmem>>, vector<8x1024xbf16>
    %cst_54 = arith.constant dense<0.000000e+00> : vector<8x1024xf32>
    %107 = tpu.matmul %105, %106, %cst_54 {dimension_numbers = #tpu.dot_dimension_numbers<[1], [0], [0], [1], [0, 0, 1, 1], [], []>} : vector<8x8xbf16>, vector<8x1024xbf16>, vector<8x1024xf32> -> vector<8x1024xf32>
    %108 = arith.addf %103, %107 : vector<8x1024xf32>
    %109 = vector.extract_strided_slice %9 {offsets = [20, 0, 0], sizes = [1, 8, 8], strides = [1, 1, 1]} : vector<27x8x8xbf16> to vector<1x8x8xbf16>
    %110 = vector.shape_cast %109 : vector<1x8x8xbf16> to vector<8x8xbf16>
    %c0_55 = arith.constant 0 : index
    %c219 = arith.constant 219 : index
    %111 = vector.load %arg10[%c0_55, %c219] : memref<8x1280xbf16, #tpu.memory_space<vmem>>, vector<8x1024xbf16>
    %cst_56 = arith.constant dense<0.000000e+00> : vector<8x1024xf32>
    %112 = tpu.matmul %110, %111, %cst_56 {dimension_numbers = #tpu.dot_dimension_numbers<[1], [0], [0], [1], [0, 0, 1, 1], [], []>} : vector<8x8xbf16>, vector<8x1024xbf16>, vector<8x1024xf32> -> vector<8x1024xf32>
    %113 = arith.addf %108, %112 : vector<8x1024xf32>
    %114 = vector.extract_strided_slice %9 {offsets = [21, 0, 0], sizes = [1, 8, 8], strides = [1, 1, 1]} : vector<27x8x8xbf16> to vector<1x8x8xbf16>
    %115 = vector.shape_cast %114 : vector<1x8x8xbf16> to vector<8x8xbf16>
    %c0_57 = arith.constant 0 : index
    %c227 = arith.constant 227 : index
    %116 = vector.load %arg10[%c0_57, %c227] : memref<8x1280xbf16, #tpu.memory_space<vmem>>, vector<8x1024xbf16>
    %cst_58 = arith.constant dense<0.000000e+00> : vector<8x1024xf32>
    %117 = tpu.matmul %115, %116, %cst_58 {dimension_numbers = #tpu.dot_dimension_numbers<[1], [0], [0], [1], [0, 0, 1, 1], [], []>} : vector<8x8xbf16>, vector<8x1024xbf16>, vector<8x1024xf32> -> vector<8x1024xf32>
    %118 = arith.addf %113, %117 : vector<8x1024xf32>
    %119 = vector.extract_strided_slice %9 {offsets = [22, 0, 0], sizes = [1, 8, 8], strides = [1, 1, 1]} : vector<27x8x8xbf16> to vector<1x8x8xbf16>
    %120 = vector.shape_cast %119 : vector<1x8x8xbf16> to vector<8x8xbf16>
    %c0_59 = arith.constant 0 : index
    %c228 = arith.constant 228 : index
    %121 = vector.load %arg10[%c0_59, %c228] : memref<8x1280xbf16, #tpu.memory_space<vmem>>, vector<8x1024xbf16>
    %cst_60 = arith.constant dense<0.000000e+00> : vector<8x1024xf32>
    %122 = tpu.matmul %120, %121, %cst_60 {dimension_numbers = #tpu.dot_dimension_numbers<[1], [0], [0], [1], [0, 0, 1, 1], [], []>} : vector<8x8xbf16>, vector<8x1024xbf16>, vector<8x1024xf32> -> vector<8x1024xf32>
    %123 = arith.addf %118, %122 : vector<8x1024xf32>
    %124 = vector.extract_strided_slice %9 {offsets = [23, 0, 0], sizes = [1, 8, 8], strides = [1, 1, 1]} : vector<27x8x8xbf16> to vector<1x8x8xbf16>
    %125 = vector.shape_cast %124 : vector<1x8x8xbf16> to vector<8x8xbf16>
    %c0_61 = arith.constant 0 : index
    %c229 = arith.constant 229 : index
    %126 = vector.load %arg10[%c0_61, %c229] : memref<8x1280xbf16, #tpu.memory_space<vmem>>, vector<8x1024xbf16>
    %cst_62 = arith.constant dense<0.000000e+00> : vector<8x1024xf32>
    %127 = tpu.matmul %125, %126, %cst_62 {dimension_numbers = #tpu.dot_dimension_numbers<[1], [0], [0], [1], [0, 0, 1, 1], [], []>} : vector<8x8xbf16>, vector<8x1024xbf16>, vector<8x1024xf32> -> vector<8x1024xf32>
    %128 = arith.addf %123, %127 : vector<8x1024xf32>
    %129 = vector.extract_strided_slice %9 {offsets = [24, 0, 0], sizes = [1, 8, 8], strides = [1, 1, 1]} : vector<27x8x8xbf16> to vector<1x8x8xbf16>
    %130 = vector.shape_cast %129 : vector<1x8x8xbf16> to vector<8x8xbf16>
    %c0_63 = arith.constant 0 : index
    %c237 = arith.constant 237 : index
    %131 = vector.load %arg10[%c0_63, %c237] : memref<8x1280xbf16, #tpu.memory_space<vmem>>, vector<8x1024xbf16>
    %cst_64 = arith.constant dense<0.000000e+00> : vector<8x1024xf32>
    %132 = tpu.matmul %130, %131, %cst_64 {dimension_numbers = #tpu.dot_dimension_numbers<[1], [0], [0], [1], [0, 0, 1, 1], [], []>} : vector<8x8xbf16>, vector<8x1024xbf16>, vector<8x1024xf32> -> vector<8x1024xf32>
    %133 = arith.addf %128, %132 : vector<8x1024xf32>
    %134 = vector.extract_strided_slice %9 {offsets = [25, 0, 0], sizes = [1, 8, 8], strides = [1, 1, 1]} : vector<27x8x8xbf16> to vector<1x8x8xbf16>
    %135 = vector.shape_cast %134 : vector<1x8x8xbf16> to vector<8x8xbf16>
    %c0_65 = arith.constant 0 : index
    %c238 = arith.constant 238 : index
    %136 = vector.load %arg10[%c0_65, %c238] : memref<8x1280xbf16, #tpu.memory_space<vmem>>, vector<8x1024xbf16>
    %cst_66 = arith.constant dense<0.000000e+00> : vector<8x1024xf32>
    %137 = tpu.matmul %135, %136, %cst_66 {dimension_numbers = #tpu.dot_dimension_numbers<[1], [0], [0], [1], [0, 0, 1, 1], [], []>} : vector<8x8xbf16>, vector<8x1024xbf16>, vector<8x1024xf32> -> vector<8x1024xf32>
    %138 = arith.addf %133, %137 : vector<8x1024xf32>
    %139 = vector.extract_strided_slice %9 {offsets = [26, 0, 0], sizes = [1, 8, 8], strides = [1, 1, 1]} : vector<27x8x8xbf16> to vector<1x8x8xbf16>
    %140 = vector.shape_cast %139 : vector<1x8x8xbf16> to vector<8x8xbf16>
    %c0_67 = arith.constant 0 : index
    %c239 = arith.constant 239 : index
    %141 = vector.load %arg10[%c0_67, %c239] : memref<8x1280xbf16, #tpu.memory_space<vmem>>, vector<8x1024xbf16>
    %cst_68 = arith.constant dense<0.000000e+00> : vector<8x1024xf32>
    %142 = tpu.matmul %140, %141, %cst_68 {dimension_numbers = #tpu.dot_dimension_numbers<[1], [0], [0], [1], [0, 0, 1, 1], [], []>} : vector<8x8xbf16>, vector<8x1024xbf16>, vector<8x1024xf32> -> vector<8x1024xf32>
    %143 = arith.addf %138, %142 : vector<8x1024xf32>
    %c0_69 = arith.constant 0 : index
    %c0_70 = arith.constant 0 : index
    %144 = vector.load %arg4[%c0_69, %c0_70] : memref<8x1xf32, #tpu.memory_space<vmem>>, vector<8x1xf32>
    %145 = vector.broadcast %144 : vector<8x1xf32> to vector<8x1024xf32>
    %146 = arith.addf %143, %145 : vector<8x1024xf32>
    %cst_71 = arith.constant 0.000000e+00 : f32
    %147 = vector.broadcast %cst_71 : f32 to vector<8x1024xf32>
    %148 = arith.maximumf %146, %147 : vector<8x1024xf32>
    %149 = vector.broadcast %8 : vector<1x1024xf32> to vector<8x1024xf32>
    %150 = arith.mulf %148, %149 : vector<8x1024xf32>
    %151 = arith.truncf %150 : vector<8x1024xf32> to vector<8x1024xbf16>
    %c0_72 = arith.constant 0 : index
    %c128_73 = arith.constant 128 : index
    %152 = vector.load %arg11[%c0_72, %c128_73] : memref<8x1280xbf16, #tpu.memory_space<vmem>>, vector<8x1024xbf16>
    tpu.vector_store %arg11[%c0_72, %c128_73], %151 {strides = array<i32>} : memref<8x1280xbf16, #tpu.memory_space<vmem>>, vector<8x1024xbf16>,
    %c0_74 = arith.constant 0 : index
    %c0_75 = arith.constant 0 : index
    %c0_76 = arith.constant 0 : index
    %153 = vector.load %arg5[%c0_74, %c0_75, %c0_76] : memref<27x8x8xbf16, #tpu.memory_space<vmem>>, vector<27x8x8xbf16>
    %154 = vector.extract_strided_slice %153 {offsets = [0, 0, 0], sizes = [1, 8, 8], strides = [1, 1, 1]} : vector<27x8x8xbf16> to vector<1x8x8xbf16>
    %155 = vector.shape_cast %154 : vector<1x8x8xbf16> to vector<8x8xbf16>
    %c0_77 = arith.constant 0 : index
    %c17_78 = arith.constant 17 : index
    %156 = vector.load %arg11[%c0_77, %c17_78] : memref<8x1280xbf16, #tpu.memory_space<vmem>>, vector<8x1024xbf16>
    %cst_79 = arith.constant dense<0.000000e+00> : vector<8x1024xf32>
    %157 = tpu.matmul %155, %156, %cst_79 {dimension_numbers = #tpu.dot_dimension_numbers<[1], [0], [0], [1], [0, 0, 1, 1], [], []>} : vector<8x8xbf16>, vector<8x1024xbf16>, vector<8x1024xf32> -> vector<8x1024xf32>
    %158 = vector.extract_strided_slice %153 {offsets = [1, 0, 0], sizes = [1, 8, 8], strides = [1, 1, 1]} : vector<27x8x8xbf16> to vector<1x8x8xbf16>
    %159 = vector.shape_cast %158 : vector<1x8x8xbf16> to vector<8x8xbf16>
    %c0_80 = arith.constant 0 : index
    %c18_81 = arith.constant 18 : index
    %160 = vector.load %arg11[%c0_80, %c18_81] : memref<8x1280xbf16, #tpu.memory_space<vmem>>, vector<8x1024xbf16>
    %cst_82 = arith.constant dense<0.000000e+00> : vector<8x1024xf32>
    %161 = tpu.matmul %159, %160, %cst_82 {dimension_numbers = #tpu.dot_dimension_numbers<[1], [0], [0], [1], [0, 0, 1, 1], [], []>} : vector<8x8xbf16>, vector<8x1024xbf16>, vector<8x1024xf32> -> vector<8x1024xf32>
    %162 = arith.addf %157, %161 : vector<8x1024xf32>
    %163 = vector.extract_strided_slice %153 {offsets = [2, 0, 0], sizes = [1, 8, 8], strides = [1, 1, 1]} : vector<27x8x8xbf16> to vector<1x8x8xbf16>
    %164 = vector.shape_cast %163 : vector<1x8x8xbf16> to vector<8x8xbf16>
    %c0_83 = arith.constant 0 : index
    %c19_84 = arith.constant 19 : index
    %165 = vector.load %arg11[%c0_83, %c19_84] : memref<8x1280xbf16, #tpu.memory_space<vmem>>, vector<8x1024xbf16>
    %cst_85 = arith.constant dense<0.000000e+00> : vector<8x1024xf32>
    %166 = tpu.matmul %164, %165, %cst_85 {dimension_numbers = #tpu.dot_dimension_numbers<[1], [0], [0], [1], [0, 0, 1, 1], [], []>} : vector<8x8xbf16>, vector<8x1024xbf16>, vector<8x1024xf32> -> vector<8x1024xf32>
    %167 = arith.addf %162, %166 : vector<8x1024xf32>
    %168 = vector.extract_strided_slice %153 {offsets = [3, 0, 0], sizes = [1, 8, 8], strides = [1, 1, 1]} : vector<27x8x8xbf16> to vector<1x8x8xbf16>
    %169 = vector.shape_cast %168 : vector<1x8x8xbf16> to vector<8x8xbf16>
    %c0_86 = arith.constant 0 : index
    %c27_87 = arith.constant 27 : index
    %170 = vector.load %arg11[%c0_86, %c27_87] : memref<8x1280xbf16, #tpu.memory_space<vmem>>, vector<8x1024xbf16>
    %cst_88 = arith.constant dense<0.000000e+00> : vector<8x1024xf32>
    %171 = tpu.matmul %169, %170, %cst_88 {dimension_numbers = #tpu.dot_dimension_numbers<[1], [0], [0], [1], [0, 0, 1, 1], [], []>} : vector<8x8xbf16>, vector<8x1024xbf16>, vector<8x1024xf32> -> vector<8x1024xf32>
    %172 = arith.addf %167, %171 : vector<8x1024xf32>
    %173 = vector.extract_strided_slice %153 {offsets = [4, 0, 0], sizes = [1, 8, 8], strides = [1, 1, 1]} : vector<27x8x8xbf16> to vector<1x8x8xbf16>
    %174 = vector.shape_cast %173 : vector<1x8x8xbf16> to vector<8x8xbf16>
    %c0_89 = arith.constant 0 : index
    %c28_90 = arith.constant 28 : index
    %175 = vector.load %arg11[%c0_89, %c28_90] : memref<8x1280xbf16, #tpu.memory_space<vmem>>, vector<8x1024xbf16>
    %cst_91 = arith.constant dense<0.000000e+00> : vector<8x1024xf32>
    %176 = tpu.matmul %174, %175, %cst_91 {dimension_numbers = #tpu.dot_dimension_numbers<[1], [0], [0], [1], [0, 0, 1, 1], [], []>} : vector<8x8xbf16>, vector<8x1024xbf16>, vector<8x1024xf32> -> vector<8x1024xf32>
    %177 = arith.addf %172, %176 : vector<8x1024xf32>
    %178 = vector.extract_strided_slice %153 {offsets = [5, 0, 0], sizes = [1, 8, 8], strides = [1, 1, 1]} : vector<27x8x8xbf16> to vector<1x8x8xbf16>
    %179 = vector.shape_cast %178 : vector<1x8x8xbf16> to vector<8x8xbf16>
    %c0_92 = arith.constant 0 : index
    %c29_93 = arith.constant 29 : index
    %180 = vector.load %arg11[%c0_92, %c29_93] : memref<8x1280xbf16, #tpu.memory_space<vmem>>, vector<8x1024xbf16>
    %cst_94 = arith.constant dense<0.000000e+00> : vector<8x1024xf32>
    %181 = tpu.matmul %179, %180, %cst_94 {dimension_numbers = #tpu.dot_dimension_numbers<[1], [0], [0], [1], [0, 0, 1, 1], [], []>} : vector<8x8xbf16>, vector<8x1024xbf16>, vector<8x1024xf32> -> vector<8x1024xf32>
    %182 = arith.addf %177, %181 : vector<8x1024xf32>
    %183 = vector.extract_strided_slice %153 {offsets = [6, 0, 0], sizes = [1, 8, 8], strides = [1, 1, 1]} : vector<27x8x8xbf16> to vector<1x8x8xbf16>
    %184 = vector.shape_cast %183 : vector<1x8x8xbf16> to vector<8x8xbf16>
    %c0_95 = arith.constant 0 : index
    %c37_96 = arith.constant 37 : index
    %185 = vector.load %arg11[%c0_95, %c37_96] : memref<8x1280xbf16, #tpu.memory_space<vmem>>, vector<8x1024xbf16>
    %cst_97 = arith.constant dense<0.000000e+00> : vector<8x1024xf32>
    %186 = tpu.matmul %184, %185, %cst_97 {dimension_numbers = #tpu.dot_dimension_numbers<[1], [0], [0], [1], [0, 0, 1, 1], [], []>} : vector<8x8xbf16>, vector<8x1024xbf16>, vector<8x1024xf32> -> vector<8x1024xf32>
    %187 = arith.addf %182, %186 : vector<8x1024xf32>
    %188 = vector.extract_strided_slice %153 {offsets = [7, 0, 0], sizes = [1, 8, 8], strides = [1, 1, 1]} : vector<27x8x8xbf16> to vector<1x8x8xbf16>
    %189 = vector.shape_cast %188 : vector<1x8x8xbf16> to vector<8x8xbf16>
    %c0_98 = arith.constant 0 : index
    %c38_99 = arith.constant 38 : index
    %190 = vector.load %arg11[%c0_98, %c38_99] : memref<8x1280xbf16, #tpu.memory_space<vmem>>, vector<8x1024xbf16>
    %cst_100 = arith.constant dense<0.000000e+00> : vector<8x1024xf32>
    %191 = tpu.matmul %189, %190, %cst_100 {dimension_numbers = #tpu.dot_dimension_numbers<[1], [0], [0], [1], [0, 0, 1, 1], [], []>} : vector<8x8xbf16>, vector<8x1024xbf16>, vector<8x1024xf32> -> vector<8x1024xf32>
    %192 = arith.addf %187, %191 : vector<8x1024xf32>
    %193 = vector.extract_strided_slice %153 {offsets = [8, 0, 0], sizes = [1, 8, 8], strides = [1, 1, 1]} : vector<27x8x8xbf16> to vector<1x8x8xbf16>
    %194 = vector.shape_cast %193 : vector<1x8x8xbf16> to vector<8x8xbf16>
    %c0_101 = arith.constant 0 : index
    %c39_102 = arith.constant 39 : index
    %195 = vector.load %arg11[%c0_101, %c39_102] : memref<8x1280xbf16, #tpu.memory_space<vmem>>, vector<8x1024xbf16>
    %cst_103 = arith.constant dense<0.000000e+00> : vector<8x1024xf32>
    %196 = tpu.matmul %194, %195, %cst_103 {dimension_numbers = #tpu.dot_dimension_numbers<[1], [0], [0], [1], [0, 0, 1, 1], [], []>} : vector<8x8xbf16>, vector<8x1024xbf16>, vector<8x1024xf32> -> vector<8x1024xf32>
    %197 = arith.addf %192, %196 : vector<8x1024xf32>
    %198 = vector.extract_strided_slice %153 {offsets = [9, 0, 0], sizes = [1, 8, 8], strides = [1, 1, 1]} : vector<27x8x8xbf16> to vector<1x8x8xbf16>
    %199 = vector.shape_cast %198 : vector<1x8x8xbf16> to vector<8x8xbf16>
    %c0_104 = arith.constant 0 : index
    %c117_105 = arith.constant 117 : index
    %200 = vector.load %arg11[%c0_104, %c117_105] : memref<8x1280xbf16, #tpu.memory_space<vmem>>, vector<8x1024xbf16>
    %cst_106 = arith.constant dense<0.000000e+00> : vector<8x1024xf32>
    %201 = tpu.matmul %199, %200, %cst_106 {dimension_numbers = #tpu.dot_dimension_numbers<[1], [0], [0], [1], [0, 0, 1, 1], [], []>} : vector<8x8xbf16>, vector<8x1024xbf16>, vector<8x1024xf32> -> vector<8x1024xf32>
    %202 = arith.addf %197, %201 : vector<8x1024xf32>
    %203 = vector.extract_strided_slice %153 {offsets = [10, 0, 0], sizes = [1, 8, 8], strides = [1, 1, 1]} : vector<27x8x8xbf16> to vector<1x8x8xbf16>
    %204 = vector.shape_cast %203 : vector<1x8x8xbf16> to vector<8x8xbf16>
    %c0_107 = arith.constant 0 : index
    %c118_108 = arith.constant 118 : index
    %205 = vector.load %arg11[%c0_107, %c118_108] : memref<8x1280xbf16, #tpu.memory_space<vmem>>, vector<8x1024xbf16>
    %cst_109 = arith.constant dense<0.000000e+00> : vector<8x1024xf32>
    %206 = tpu.matmul %204, %205, %cst_109 {dimension_numbers = #tpu.dot_dimension_numbers<[1], [0], [0], [1], [0, 0, 1, 1], [], []>} : vector<8x8xbf16>, vector<8x1024xbf16>, vector<8x1024xf32> -> vector<8x1024xf32>
    %207 = arith.addf %202, %206 : vector<8x1024xf32>
    %208 = vector.extract_strided_slice %153 {offsets = [11, 0, 0], sizes = [1, 8, 8], strides = [1, 1, 1]} : vector<27x8x8xbf16> to vector<1x8x8xbf16>
    %209 = vector.shape_cast %208 : vector<1x8x8xbf16> to vector<8x8xbf16>
    %c0_110 = arith.constant 0 : index
    %c119_111 = arith.constant 119 : index
    %210 = vector.load %arg11[%c0_110, %c119_111] : memref<8x1280xbf16, #tpu.memory_space<vmem>>, vector<8x1024xbf16>
    %cst_112 = arith.constant dense<0.000000e+00> : vector<8x1024xf32>
    %211 = tpu.matmul %209, %210, %cst_112 {dimension_numbers = #tpu.dot_dimension_numbers<[1], [0], [0], [1], [0, 0, 1, 1], [], []>} : vector<8x8xbf16>, vector<8x1024xbf16>, vector<8x1024xf32> -> vector<8x1024xf32>
    %212 = arith.addf %207, %211 : vector<8x1024xf32>
    %213 = vector.extract_strided_slice %153 {offsets = [12, 0, 0], sizes = [1, 8, 8], strides = [1, 1, 1]} : vector<27x8x8xbf16> to vector<1x8x8xbf16>
    %214 = vector.shape_cast %213 : vector<1x8x8xbf16> to vector<8x8xbf16>
    %c0_113 = arith.constant 0 : index
    %c127_114 = arith.constant 127 : index
    %215 = vector.load %arg11[%c0_113, %c127_114] : memref<8x1280xbf16, #tpu.memory_space<vmem>>, vector<8x1024xbf16>
    %cst_115 = arith.constant dense<0.000000e+00> : vector<8x1024xf32>
    %216 = tpu.matmul %214, %215, %cst_115 {dimension_numbers = #tpu.dot_dimension_numbers<[1], [0], [0], [1], [0, 0, 1, 1], [], []>} : vector<8x8xbf16>, vector<8x1024xbf16>, vector<8x1024xf32> -> vector<8x1024xf32>
    %217 = arith.addf %212, %216 : vector<8x1024xf32>
    %218 = vector.extract_strided_slice %153 {offsets = [13, 0, 0], sizes = [1, 8, 8], strides = [1, 1, 1]} : vector<27x8x8xbf16> to vector<1x8x8xbf16>
    %219 = vector.shape_cast %218 : vector<1x8x8xbf16> to vector<8x8xbf16>
    %c0_116 = arith.constant 0 : index
    %c128_117 = arith.constant 128 : index
    %220 = vector.load %arg11[%c0_116, %c128_117] : memref<8x1280xbf16, #tpu.memory_space<vmem>>, vector<8x1024xbf16>
    %cst_118 = arith.constant dense<0.000000e+00> : vector<8x1024xf32>
    %221 = tpu.matmul %219, %220, %cst_118 {dimension_numbers = #tpu.dot_dimension_numbers<[1], [0], [0], [1], [0, 0, 1, 1], [], []>} : vector<8x8xbf16>, vector<8x1024xbf16>, vector<8x1024xf32> -> vector<8x1024xf32>
    %222 = arith.addf %217, %221 : vector<8x1024xf32>
    %223 = vector.extract_strided_slice %153 {offsets = [14, 0, 0], sizes = [1, 8, 8], strides = [1, 1, 1]} : vector<27x8x8xbf16> to vector<1x8x8xbf16>
    %224 = vector.shape_cast %223 : vector<1x8x8xbf16> to vector<8x8xbf16>
    %c0_119 = arith.constant 0 : index
    %c129_120 = arith.constant 129 : index
    %225 = vector.load %arg11[%c0_119, %c129_120] : memref<8x1280xbf16, #tpu.memory_space<vmem>>, vector<8x1024xbf16>
    %cst_121 = arith.constant dense<0.000000e+00> : vector<8x1024xf32>
    %226 = tpu.matmul %224, %225, %cst_121 {dimension_numbers = #tpu.dot_dimension_numbers<[1], [0], [0], [1], [0, 0, 1, 1], [], []>} : vector<8x8xbf16>, vector<8x1024xbf16>, vector<8x1024xf32> -> vector<8x1024xf32>
    %227 = arith.addf %222, %226 : vector<8x1024xf32>
    %228 = vector.extract_strided_slice %153 {offsets = [15, 0, 0], sizes = [1, 8, 8], strides = [1, 1, 1]} : vector<27x8x8xbf16> to vector<1x8x8xbf16>
    %229 = vector.shape_cast %228 : vector<1x8x8xbf16> to vector<8x8xbf16>
    %c0_122 = arith.constant 0 : index
    %c137_123 = arith.constant 137 : index
    %230 = vector.load %arg11[%c0_122, %c137_123] : memref<8x1280xbf16, #tpu.memory_space<vmem>>, vector<8x1024xbf16>
    %cst_124 = arith.constant dense<0.000000e+00> : vector<8x1024xf32>
    %231 = tpu.matmul %229, %230, %cst_124 {dimension_numbers = #tpu.dot_dimension_numbers<[1], [0], [0], [1], [0, 0, 1, 1], [], []>} : vector<8x8xbf16>, vector<8x1024xbf16>, vector<8x1024xf32> -> vector<8x1024xf32>
    %232 = arith.addf %227, %231 : vector<8x1024xf32>
    %233 = vector.extract_strided_slice %153 {offsets = [16, 0, 0], sizes = [1, 8, 8], strides = [1, 1, 1]} : vector<27x8x8xbf16> to vector<1x8x8xbf16>
    %234 = vector.shape_cast %233 : vector<1x8x8xbf16> to vector<8x8xbf16>
    %c0_125 = arith.constant 0 : index
    %c138_126 = arith.constant 138 : index
    %235 = vector.load %arg11[%c0_125, %c138_126] : memref<8x1280xbf16, #tpu.memory_space<vmem>>, vector<8x1024xbf16>
    %cst_127 = arith.constant dense<0.000000e+00> : vector<8x1024xf32>
    %236 = tpu.matmul %234, %235, %cst_127 {dimension_numbers = #tpu.dot_dimension_numbers<[1], [0], [0], [1], [0, 0, 1, 1], [], []>} : vector<8x8xbf16>, vector<8x1024xbf16>, vector<8x1024xf32> -> vector<8x1024xf32>
    %237 = arith.addf %232, %236 : vector<8x1024xf32>
    %238 = vector.extract_strided_slice %153 {offsets = [17, 0, 0], sizes = [1, 8, 8], strides = [1, 1, 1]} : vector<27x8x8xbf16> to vector<1x8x8xbf16>
    %239 = vector.shape_cast %238 : vector<1x8x8xbf16> to vector<8x8xbf16>
    %c0_128 = arith.constant 0 : index
    %c139_129 = arith.constant 139 : index
    %240 = vector.load %arg11[%c0_128, %c139_129] : memref<8x1280xbf16, #tpu.memory_space<vmem>>, vector<8x1024xbf16>
    %cst_130 = arith.constant dense<0.000000e+00> : vector<8x1024xf32>
    %241 = tpu.matmul %239, %240, %cst_130 {dimension_numbers = #tpu.dot_dimension_numbers<[1], [0], [0], [1], [0, 0, 1, 1], [], []>} : vector<8x8xbf16>, vector<8x1024xbf16>, vector<8x1024xf32> -> vector<8x1024xf32>
    %242 = arith.addf %237, %241 : vector<8x1024xf32>
    %243 = vector.extract_strided_slice %153 {offsets = [18, 0, 0], sizes = [1, 8, 8], strides = [1, 1, 1]} : vector<27x8x8xbf16> to vector<1x8x8xbf16>
    %244 = vector.shape_cast %243 : vector<1x8x8xbf16> to vector<8x8xbf16>
    %c0_131 = arith.constant 0 : index
    %c217_132 = arith.constant 217 : index
    %245 = vector.load %arg11[%c0_131, %c217_132] : memref<8x1280xbf16, #tpu.memory_space<vmem>>, vector<8x1024xbf16>
    %cst_133 = arith.constant dense<0.000000e+00> : vector<8x1024xf32>
    %246 = tpu.matmul %244, %245, %cst_133 {dimension_numbers = #tpu.dot_dimension_numbers<[1], [0], [0], [1], [0, 0, 1, 1], [], []>} : vector<8x8xbf16>, vector<8x1024xbf16>, vector<8x1024xf32> -> vector<8x1024xf32>
    %247 = arith.addf %242, %246 : vector<8x1024xf32>
    %248 = vector.extract_strided_slice %153 {offsets = [19, 0, 0], sizes = [1, 8, 8], strides = [1, 1, 1]} : vector<27x8x8xbf16> to vector<1x8x8xbf16>
    %249 = vector.shape_cast %248 : vector<1x8x8xbf16> to vector<8x8xbf16>
    %c0_134 = arith.constant 0 : index
    %c218_135 = arith.constant 218 : index
    %250 = vector.load %arg11[%c0_134, %c218_135] : memref<8x1280xbf16, #tpu.memory_space<vmem>>, vector<8x1024xbf16>
    %cst_136 = arith.constant dense<0.000000e+00> : vector<8x1024xf32>
    %251 = tpu.matmul %249, %250, %cst_136 {dimension_numbers = #tpu.dot_dimension_numbers<[1], [0], [0], [1], [0, 0, 1, 1], [], []>} : vector<8x8xbf16>, vector<8x1024xbf16>, vector<8x1024xf32> -> vector<8x1024xf32>
    %252 = arith.addf %247, %251 : vector<8x1024xf32>
    %253 = vector.extract_strided_slice %153 {offsets = [20, 0, 0], sizes = [1, 8, 8], strides = [1, 1, 1]} : vector<27x8x8xbf16> to vector<1x8x8xbf16>
    %254 = vector.shape_cast %253 : vector<1x8x8xbf16> to vector<8x8xbf16>
    %c0_137 = arith.constant 0 : index
    %c219_138 = arith.constant 219 : index
    %255 = vector.load %arg11[%c0_137, %c219_138] : memref<8x1280xbf16, #tpu.memory_space<vmem>>, vector<8x1024xbf16>
    %cst_139 = arith.constant dense<0.000000e+00> : vector<8x1024xf32>
    %256 = tpu.matmul %254, %255, %cst_139 {dimension_numbers = #tpu.dot_dimension_numbers<[1], [0], [0], [1], [0, 0, 1, 1], [], []>} : vector<8x8xbf16>, vector<8x1024xbf16>, vector<8x1024xf32> -> vector<8x1024xf32>
    %257 = arith.addf %252, %256 : vector<8x1024xf32>
    %258 = vector.extract_strided_slice %153 {offsets = [21, 0, 0], sizes = [1, 8, 8], strides = [1, 1, 1]} : vector<27x8x8xbf16> to vector<1x8x8xbf16>
    %259 = vector.shape_cast %258 : vector<1x8x8xbf16> to vector<8x8xbf16>
    %c0_140 = arith.constant 0 : index
    %c227_141 = arith.constant 227 : index
    %260 = vector.load %arg11[%c0_140, %c227_141] : memref<8x1280xbf16, #tpu.memory_space<vmem>>, vector<8x1024xbf16>
    %cst_142 = arith.constant dense<0.000000e+00> : vector<8x1024xf32>
    %261 = tpu.matmul %259, %260, %cst_142 {dimension_numbers = #tpu.dot_dimension_numbers<[1], [0], [0], [1], [0, 0, 1, 1], [], []>} : vector<8x8xbf16>, vector<8x1024xbf16>, vector<8x1024xf32> -> vector<8x1024xf32>
    %262 = arith.addf %257, %261 : vector<8x1024xf32>
    %263 = vector.extract_strided_slice %153 {offsets = [22, 0, 0], sizes = [1, 8, 8], strides = [1, 1, 1]} : vector<27x8x8xbf16> to vector<1x8x8xbf16>
    %264 = vector.shape_cast %263 : vector<1x8x8xbf16> to vector<8x8xbf16>
    %c0_143 = arith.constant 0 : index
    %c228_144 = arith.constant 228 : index
    %265 = vector.load %arg11[%c0_143, %c228_144] : memref<8x1280xbf16, #tpu.memory_space<vmem>>, vector<8x1024xbf16>
    %cst_145 = arith.constant dense<0.000000e+00> : vector<8x1024xf32>
    %266 = tpu.matmul %264, %265, %cst_145 {dimension_numbers = #tpu.dot_dimension_numbers<[1], [0], [0], [1], [0, 0, 1, 1], [], []>} : vector<8x8xbf16>, vector<8x1024xbf16>, vector<8x1024xf32> -> vector<8x1024xf32>
    %267 = arith.addf %262, %266 : vector<8x1024xf32>
    %268 = vector.extract_strided_slice %153 {offsets = [23, 0, 0], sizes = [1, 8, 8], strides = [1, 1, 1]} : vector<27x8x8xbf16> to vector<1x8x8xbf16>
    %269 = vector.shape_cast %268 : vector<1x8x8xbf16> to vector<8x8xbf16>
    %c0_146 = arith.constant 0 : index
    %c229_147 = arith.constant 229 : index
    %270 = vector.load %arg11[%c0_146, %c229_147] : memref<8x1280xbf16, #tpu.memory_space<vmem>>, vector<8x1024xbf16>
    %cst_148 = arith.constant dense<0.000000e+00> : vector<8x1024xf32>
    %271 = tpu.matmul %269, %270, %cst_148 {dimension_numbers = #tpu.dot_dimension_numbers<[1], [0], [0], [1], [0, 0, 1, 1], [], []>} : vector<8x8xbf16>, vector<8x1024xbf16>, vector<8x1024xf32> -> vector<8x1024xf32>
    %272 = arith.addf %267, %271 : vector<8x1024xf32>
    %273 = vector.extract_strided_slice %153 {offsets = [24, 0, 0], sizes = [1, 8, 8], strides = [1, 1, 1]} : vector<27x8x8xbf16> to vector<1x8x8xbf16>
    %274 = vector.shape_cast %273 : vector<1x8x8xbf16> to vector<8x8xbf16>
    %c0_149 = arith.constant 0 : index
    %c237_150 = arith.constant 237 : index
    %275 = vector.load %arg11[%c0_149, %c237_150] : memref<8x1280xbf16, #tpu.memory_space<vmem>>, vector<8x1024xbf16>
    %cst_151 = arith.constant dense<0.000000e+00> : vector<8x1024xf32>
    %276 = tpu.matmul %274, %275, %cst_151 {dimension_numbers = #tpu.dot_dimension_numbers<[1], [0], [0], [1], [0, 0, 1, 1], [], []>} : vector<8x8xbf16>, vector<8x1024xbf16>, vector<8x1024xf32> -> vector<8x1024xf32>
    %277 = arith.addf %272, %276 : vector<8x1024xf32>
    %278 = vector.extract_strided_slice %153 {offsets = [25, 0, 0], sizes = [1, 8, 8], strides = [1, 1, 1]} : vector<27x8x8xbf16> to vector<1x8x8xbf16>
    %279 = vector.shape_cast %278 : vector<1x8x8xbf16> to vector<8x8xbf16>
    %c0_152 = arith.constant 0 : index
    %c238_153 = arith.constant 238 : index
    %280 = vector.load %arg11[%c0_152, %c238_153] : memref<8x1280xbf16, #tpu.memory_space<vmem>>, vector<8x1024xbf16>
    %cst_154 = arith.constant dense<0.000000e+00> : vector<8x1024xf32>
    %281 = tpu.matmul %279, %280, %cst_154 {dimension_numbers = #tpu.dot_dimension_numbers<[1], [0], [0], [1], [0, 0, 1, 1], [], []>} : vector<8x8xbf16>, vector<8x1024xbf16>, vector<8x1024xf32> -> vector<8x1024xf32>
    %282 = arith.addf %277, %281 : vector<8x1024xf32>
    %283 = vector.extract_strided_slice %153 {offsets = [26, 0, 0], sizes = [1, 8, 8], strides = [1, 1, 1]} : vector<27x8x8xbf16> to vector<1x8x8xbf16>
    %284 = vector.shape_cast %283 : vector<1x8x8xbf16> to vector<8x8xbf16>
    %c0_155 = arith.constant 0 : index
    %c239_156 = arith.constant 239 : index
    %285 = vector.load %arg11[%c0_155, %c239_156] : memref<8x1280xbf16, #tpu.memory_space<vmem>>, vector<8x1024xbf16>
    %cst_157 = arith.constant dense<0.000000e+00> : vector<8x1024xf32>
    %286 = tpu.matmul %284, %285, %cst_157 {dimension_numbers = #tpu.dot_dimension_numbers<[1], [0], [0], [1], [0, 0, 1, 1], [], []>} : vector<8x8xbf16>, vector<8x1024xbf16>, vector<8x1024xf32> -> vector<8x1024xf32>
    %287 = arith.addf %282, %286 : vector<8x1024xf32>
    %c0_158 = arith.constant 0 : index
    %c0_159 = arith.constant 0 : index
    %288 = vector.load %arg6[%c0_158, %c0_159] : memref<8x1xf32, #tpu.memory_space<vmem>>, vector<8x1xf32>
    %289 = vector.broadcast %288 : vector<8x1xf32> to vector<8x1024xf32>
    %290 = arith.addf %287, %289 : vector<8x1024xf32>
    %cst_160 = arith.constant 0.000000e+00 : f32
    %291 = vector.broadcast %cst_160 : f32 to vector<8x1024xf32>
    %292 = arith.maximumf %290, %291 : vector<8x1024xf32>
    %c0_161 = arith.constant 0 : index
    %c0_162 = arith.constant 0 : index
    %293 = vector.load %arg7[%c0_161, %c0_162] : memref<8x8xbf16, #tpu.memory_space<vmem>>, vector<8x8xbf16>
    %294 = arith.truncf %292 : vector<8x1024xf32> to vector<8x1024xbf16>
    %cst_163 = arith.constant dense<0.000000e+00> : vector<8x1024xf32>
    %295 = tpu.matmul %293, %294, %cst_163 {dimension_numbers = #tpu.dot_dimension_numbers<[1], [0], [0], [1], [0, 0, 1, 1], [], []>} : vector<8x8xbf16>, vector<8x1024xbf16>, vector<8x1024xf32> -> vector<8x1024xf32>
    %c0_164 = arith.constant 0 : index
    %c0_165 = arith.constant 0 : index
    %296 = vector.load %arg8[%c0_164, %c0_165] : memref<8x1xf32, #tpu.memory_space<vmem>>, vector<8x1xf32>
    %297 = vector.broadcast %296 : vector<8x1xf32> to vector<8x1024xf32>
    %298 = arith.addf %295, %297 : vector<8x1024xf32>
    %299 = arith.addf %298, %5 : vector<8x1024xf32>
    %c0_166 = arith.constant 0 : index
    %c0_167 = arith.constant 0 : index
    %300 = vector.load %arg9[%c0_166, %c0_167] : memref<8x1024xf32, #tpu.memory_space<vmem>>, vector<8x1024xf32>
    tpu.vector_store %arg9[%c0_166, %c0_167], %299 {strides = array<i32>} : memref<8x1024xf32, #tpu.memory_space<vmem>>, vector<8x1024xf32>,
    return
  }
  func.func @transform_0(%arg0: i32) -> (i32, i32) {
    %c0_i32 = arith.constant 0 : i32
    %c0_i32_0 = arith.constant 0 : i32
    %c0_i32_1 = arith.constant 0 : i32
    return %c0_i32, %c0_i32_0 : i32, i32
  }
  func.func @transform_1(%arg0: i32) -> (i32, i32) {
    %c0_i32 = arith.constant 0 : i32
    %c0_i32_0 = arith.constant 0 : i32
    %c0_i32_1 = arith.constant 0 : i32
    return %c0_i32, %c0_i32_0 : i32, i32
  }
  func.func @transform_2(%arg0: i32) -> (i32, i32, i32) {
    %c0_i32 = arith.constant 0 : i32
    %c0_i32_0 = arith.constant 0 : i32
    %c0_i32_1 = arith.constant 0 : i32
    %c0_i32_2 = arith.constant 0 : i32
    return %c0_i32, %c0_i32_0, %c0_i32_1 : i32, i32, i32
  }
  func.func @transform_3(%arg0: i32) -> (i32, i32) {
    %c0_i32 = arith.constant 0 : i32
    %c0_i32_0 = arith.constant 0 : i32
    %c0_i32_1 = arith.constant 0 : i32
    return %c0_i32, %c0_i32_0 : i32, i32
  }
  func.func @transform_4(%arg0: i32) -> (i32, i32, i32) {
    %c0_i32 = arith.constant 0 : i32
    %c0_i32_0 = arith.constant 0 : i32
    %c0_i32_1 = arith.constant 0 : i32
    %c0_i32_2 = arith.constant 0 : i32
    return %c0_i32, %c0_i32_0, %c0_i32_1 : i32, i32, i32
  }
  func.func @transform_5(%arg0: i32) -> (i32, i32) {
    %c0_i32 = arith.constant 0 : i32
    %c0_i32_0 = arith.constant 0 : i32
    %c0_i32_1 = arith.constant 0 : i32
    return %c0_i32, %c0_i32_0 : i32, i32
  }
  func.func @transform_6(%arg0: i32) -> (i32, i32) {
    %c0_i32 = arith.constant 0 : i32
    %c0_i32_0 = arith.constant 0 : i32
    %c0_i32_1 = arith.constant 0 : i32
    return %c0_i32, %c0_i32_0 : i32, i32
  }
  func.func @transform_7(%arg0: i32) -> (i32, i32) {
    %c0_i32 = arith.constant 0 : i32
    %c0_i32_0 = arith.constant 0 : i32
    %c0_i32_1 = arith.constant 0 : i32
    return %c0_i32, %c0_i32_0 : i32, i32
  }
  func.func @transform_8(%arg0: i32) -> (i32, i32) {
    %c0_i32 = arith.constant 0 : i32
    %c0_i32_0 = arith.constant 0 : i32
    %c0_i32_1 = arith.constant 0 : i32
    return %c0_i32, %c0_i32_0 : i32, i32
  }
}

</mosaic_0001>

<llo_original>
// kernel: resblock_pallas.1
$region0: #{resblock_pallas.1}
  #allocation0 [shape = 'u32[]', space=smem, size = 0x4, offset = 0x4, fixed_abs, tag = 'smem constant byte address 0x4 - core index']
  #allocation1 [shape = 'u32[144,128]{1,0:T(1,128)}', space=vmem, size = 0x12000, scoped, tag = 'internal scratch']
  #allocation2 [shape = 'bf16[8,1280]{1,0:T(8,128)(2,1)}', space=vmem, size = 0x5000, scoped, tag = 'scratch operand']
  #allocation3 [shape = 'bf16[8,1280]{1,0:T(8,128)(2,1)}', space=vmem, size = 0x5000, scoped, tag = 'scratch operand']
  %s0 = inlined_call_operand.vmem [shape: f32[8,1024], index: 0, kind: input, shape index: {}]
  %s1 = inlined_call_operand.vmem [shape: f32[1,1024], index: 1, kind: input, shape index: {}]
  %s2 = inlined_call_operand.vmem [shape: bf16[27,8,8], index: 2, kind: input, shape index: {}]
  %s3 = inlined_call_operand.vmem [shape: f32[8,1], index: 3, kind: input, shape index: {}]
  %s4 = inlined_call_operand.vmem [shape: bf16[27,8,8], index: 4, kind: input, shape index: {}]
  %s5 = inlined_call_operand.vmem [shape: f32[8,1], index: 5, kind: input, shape index: {}]
  %s6 = inlined_call_operand.vmem [shape: bf16[8,8], index: 6, kind: input, shape index: {}]
  %s7 = inlined_call_operand.vmem [shape: f32[8,1], index: 7, kind: input, shape index: {}]
  %s8 = inlined_call_operand.vmem [shape: f32[8,1024], index: 8, kind: output, shape index: {}]
  %s9 = sld [smem:[#allocation0]]
  $region42: #{resblock_pallas.1} parent=0
    _
  %s11 = ssub.s32 1, %s9
  %s12 = scalar_select 0, %s11, %s9
  // Predicated region
  $region2: #{resblock_pallas.1} parent=0 // pred_check
    _
  $region3: #{resblock_pallas.1} parent=0 // pred_check_branch
    %14 = sbr.rel (0) target = $region5
  $region4: #{resblock_pallas.1} parent=0 // pred_region
    _
  $region5: #{resblock_pallas.1} parent=0 // pred_fallthru
    _
  // Predicated region
  $region6: #{resblock_pallas.1} parent=0 // pred_check
    _
  $region7: #{resblock_pallas.1} parent=0 // pred_check_branch
    %16 = sbr.rel (0) target = $region9
  $region8: #{resblock_pallas.1} parent=0 // pred_region
    _
  $region9: #{resblock_pallas.1} parent=0 // pred_fallthru
    _
  // Predicated region
  $region10: #{resblock_pallas.1} parent=0 // pred_check
    _
  $region11: #{resblock_pallas.1} parent=0 // pred_check_branch
    %18 = sbr.rel (0) target = $region13
  $region12: #{resblock_pallas.1} parent=0 // pred_region
    _
  $region13: #{resblock_pallas.1} parent=0 // pred_fallthru
    _
  // Predicated region
  $region14: #{resblock_pallas.1} parent=0 // pred_check
    _
  $region15: #{resblock_pallas.1} parent=0 // pred_check_branch
    %20 = sbr.rel (0) target = $region17
  $region16: #{resblock_pallas.1} parent=0 // pred_region
    _
  $region17: #{resblock_pallas.1} parent=0 // pred_fallthru
    _
  // Predicated region
  $region18: #{resblock_pallas.1} parent=0 // pred_check
    _
  $region19: #{resblock_pallas.1} parent=0 // pred_check_branch
    %22 = sbr.rel (0) target = $region21
  $region20: #{resblock_pallas.1} parent=0 // pred_region
    _
  $region21: #{resblock_pallas.1} parent=0 // pred_fallthru
    _
  // Predicated region
  $region22: #{resblock_pallas.1} parent=0 // pred_check
    _
  $region23: #{resblock_pallas.1} parent=0 // pred_check_branch
    %24 = sbr.rel (0) target = $region25
  $region24: #{resblock_pallas.1} parent=0 // pred_region
    _
  $region25: #{resblock_pallas.1} parent=0 // pred_fallthru
    _
  // Predicated region
  $region26: #{resblock_pallas.1} parent=0 // pred_check
    _
  $region27: #{resblock_pallas.1} parent=0 // pred_check_branch
    %26 = sbr.rel (0) target = $region29
  $region28: #{resblock_pallas.1} parent=0 // pred_region
    _
  $region29: #{resblock_pallas.1} parent=0 // pred_fallthru
    _
  // Predicated region
  $region30: #{resblock_pallas.1} parent=0 // pred_check
    _
  $region31: #{resblock_pallas.1} parent=0 // pred_check_branch
    %28 = sbr.rel (0) target = $region33
  $region32: #{resblock_pallas.1} parent=0 // pred_region
    _
  $region33: #{resblock_pallas.1} parent=0 // pred_fallthru
    _
  %30 = vst [vmem:[#allocation2] sm:$0xf] 0
  %31 = vst [vmem:[#allocation2 + $0x24] sm:$0xf] 0
  %32 = vst [vmem:[#allocation3] sm:$0xf] 0
  %33 = vst [vmem:[#allocation3 + $0x24] sm:$0xf] 0
  %v34 = vld [vmem:[%s0] sm:$0xff]
  %v35 = vld [vmem:[%s0 + $0x8] sm:$0xff]
  %v36 = vld [vmem:[%s0 + $0x10] sm:$0xff]
  %v37 = vld [vmem:[%s0 + $0x18] sm:$0xff]
  %v38 = vld [vmem:[%s0 + $0x20] sm:$0xff]
  %v39 = vld [vmem:[%s0 + $0x28] sm:$0xff]
  %v40 = vld [vmem:[%s0 + $0x30] sm:$0xff]
  %v41 = vld [vmem:[%s0 + $0x38] sm:$0xff]
  %v42 = vpack.c.bf16 %v34, %v34
  %v43 = vpack.c.bf16 %v35, %v35
  %v44 = vpack.c.bf16 %v36, %v36
  %v45 = vpack.c.bf16 %v37, %v37
  %v46 = vpack.c.bf16 %v38, %v38
  %v47 = vpack.c.bf16 %v39, %v39
  %v48 = vpack.c.bf16 %v40, %v40
  %v49 = vpack.c.bf16 %v41, %v41
  %v58 = vunpack.c.l.b16 %v42
  %v59 = vunpack.c.l.b16 %v43
  %v60 = vunpack.c.l.b16 %v44
  %v61 = vunpack.c.l.b16 %v45
  %v62 = vunpack.c.l.b16 %v46
  %v63 = vunpack.c.l.b16 %v47
  %v64 = vunpack.c.l.b16 %v48
  %v65 = vunpack.c.l.b16 %v49
  %v66 = vpack.c.b16 %v59, %v58
  %v67 = vpack.c.b16 %v61, %v60
  %v68 = vpack.c.b16 %v63, %v62
  %v69 = vpack.c.b16 %v65, %v64
  %74 = vst [vmem:[#allocation2 + $0x4] sm:$0xff] %v66
  %75 = vst [vmem:[#allocation2 + $0xc] sm:$0xff] %v67
  %76 = vst [vmem:[#allocation2 + $0x14] sm:$0xff] %v68
  %77 = vst [vmem:[#allocation2 + $0x1c] sm:$0xff] %v69
  %v78 = vld [vmem:[%s1] sm:$0xff]
  %v79 = vld [vmem:[%s2] sm:$0xf]
  %v80 = vld [vmem:[%s2 + $0x4] sm:$0xf]
  %v81 = vld [vmem:[%s2 + $0x8] sm:$0xf]
  %v82 = vld [vmem:[%s2 + $0xc] sm:$0xf]
  %v83 = vld [vmem:[%s2 + $0x10] sm:$0xf]
  %v84 = vld [vmem:[%s2 + $0x14] sm:$0xf]
  %v85 = vld [vmem:[%s2 + $0x18] sm:$0xf]
  %v86 = vld [vmem:[%s2 + $0x1c] sm:$0xf]
  %v87 = vld [vmem:[%s2 + $0x20] sm:$0xf]
  %v88 = vld [vmem:[%s2 + $0x24] sm:$0xf]
  %v89 = vld [vmem:[%s2 + $0x28] sm:$0xf]
  %v90 = vld [vmem:[%s2 + $0x2c] sm:$0xf]
  %v91 = vld [vmem:[%s2 + $0x30] sm:$0xf]
  %v92 = vld [vmem:[%s2 + $0x34] sm:$0xf]
  %v93 = vld [vmem:[%s2 + $0x38] sm:$0xf]
  %v94 = vld [vmem:[%s2 + $0x3c] sm:$0xf]
  %v95 = vld [vmem:[%s2 + $0x40] sm:$0xf]
  %v96 = vld [vmem:[%s2 + $0x44] sm:$0xf]
  %v97 = vld [vmem:[%s2 + $0x48] sm:$0xf]
  %v98 = vld [vmem:[%s2 + $0x4c] sm:$0xf]
  %v99 = vld [vmem:[%s2 + $0x50] sm:$0xf]
  %v100 = vld [vmem:[%s2 + $0x54] sm:$0xf]
  %v101 = vld [vmem:[%s2 + $0x58] sm:$0xf]
  %v102 = vld [vmem:[%s2 + $0x5c] sm:$0xf]
  %v103 = vld [vmem:[%s2 + $0x60] sm:$0xf]
  %v104 = vld [vmem:[%s2 + $0x64] sm:$0xf]
  %v105 = vld [vmem:[%s2 + $0x68] sm:$0xf]
  %v106 = vld [vmem:[#allocation2] sm:$0xff]
  %v107 = vld [vmem:[#allocation2 + $0x8] sm:$0xff]
  %v108 = vld [vmem:[#allocation2 + $0x10] sm:$0xff]
  %v109 = vld [vmem:[#allocation2 + $0x18] sm:$0xff]
  %v110 = vld [vmem:[#allocation2 + $0x20] sm:$0xf]
  %v116 = vunpack.c.l.b16 %v106
  %v117 = vunpack.c.h.b16 %v106
  %v118 = vunpack.c.l.b16 %v107
  %v119 = vunpack.c.h.b16 %v107
  %v120 = vunpack.c.l.b16 %v108
  %v121 = vunpack.c.h.b16 %v108
  %v122 = vunpack.c.l.b16 %v109
  %v123 = vunpack.c.h.b16 %v109
  %v124 = vunpack.c.l.b16 %v110
  %v125 = vpack.c.b16 %v116, %v116
  %v126 = vpack.c.b16 %v117, %v117
  %v127 = vpack.c.b16 %v118, %v118
  %v128 = vpack.c.b16 %v119, %v119
  %v129 = vpack.c.b16 %v120, %v120
  %v130 = vpack.c.b16 %v121, %v121
  %v131 = vpack.c.b16 %v122, %v122
  %v132 = vpack.c.b16 %v123, %v123
  %v133 = vpack.c.b16 %v124, %v124
  %134 = vrot.lane.b32.xlu0 %v125, 110
  %v135 = vpop.permute.xlu0 %134
  %136 = vrot.lane.b32.xlu0 %v126, 110
  %v137 = vpop.permute.xlu0 %136
  %138 = vrot.lane.b32.xlu0 %v127, 110
  %v139 = vpop.permute.xlu0 %138
  %140 = vrot.lane.b32.xlu0 %v128, 110
  %v141 = vpop.permute.xlu0 %140
  %142 = vrot.lane.b32.xlu0 %v129, 110
  %v143 = vpop.permute.xlu0 %142
  %144 = vrot.lane.b32.xlu0 %v130, 110
  %v145 = vpop.permute.xlu0 %144
  %146 = vrot.lane.b32.xlu0 %v131, 110
  %v147 = vpop.permute.xlu0 %146
  %148 = vrot.lane.b32.xlu0 %v132, 110
  %v149 = vpop.permute.xlu0 %148
  %150 = vrot.lane.b32.xlu0 %v133, 110
  %v151 = vpop.permute.xlu0 %150
  %vm152 = vcmask 900096
  %v153 = vsel %vm152, %v135, %v137
  %v154 = vsel %vm152, %v137, %v139
  %v155 = vsel %vm152, %v139, %v141
  %v156 = vsel %vm152, %v141, %v143
  %v157 = vsel %vm152, %v143, %v145
  %v158 = vsel %vm152, %v145, %v147
  %v159 = vsel %vm152, %v147, %v149
  %v160 = vsel %vm152, %v149, %v151
  %vm161 = vcmask 64512
  %v163 = vsel %vm161, %v80, 0
  %vm165 = vcmask 1043456
  %v167 = vsel %vm165, %v153, 0
  %v170 = vsel %vm165, %v154, 0
  %v173 = vsel %vm165, %v155, 0
  %v176 = vsel %vm165, %v156, 0
  %v179 = vsel %vm165, %v157, 0
  %v182 = vsel %vm165, %v158, 0
  %v185 = vsel %vm165, %v159, 0
  %v188 = vsel %vm165, %v160, 0
  %190 = vmatprep.subr.bf16.mxu0 %v170
  %191 = vmatpush1.bf16.msra.mxu0 %v167
  %192 = vmatprep.subr.bf16.mxu0 0
  %193 = vmatpush1.bf16.msra.mxu0 0
  %194 = vmatprep.subr.bf16.mxu0 0
  %195 = vmatpush1.bf16.msra.mxu0 0
  %196 = vmatprep.subr.bf16.mxu0 0
  %197 = vmatpush1.bf16.msra.mxu0 0
  %198 = vmatprep.subr.bf16.mxu0 0
  %199 = vmatpush1.bf16.msra.mxu0 0
  %200 = vmatprep.subr.bf16.mxu0 0
  %201 = vmatpush1.bf16.msra.mxu0 0
  %202 = vmatprep.subr.bf16.mxu0 0
  %203 = vmatpush1.bf16.msra.mxu0 0
  %204 = vmatprep.subr.bf16.mxu0 0
  %205 = vmatpush1.bf16.msra.mxu0 0
  %206 = vmatprep.subr.bf16.mxu0 0
  %207 = vmatpush1.bf16.msra.mxu0 0
  %208 = vmatprep.subr.bf16.mxu0 0
  %209 = vmatpush1.bf16.msra.mxu0 0
  %210 = vmatprep.subr.bf16.mxu0 0
  %211 = vmatpush1.bf16.msra.mxu0 0
  %212 = vmatprep.subr.bf16.mxu0 0
  %213 = vmatpush1.bf16.msra.mxu0 0
  %214 = vmatprep.subr.bf16.mxu0 0
  %215 = vmatpush1.bf16.msra.mxu0 0
  %216 = vmatprep.subr.bf16.mxu0 0
  %217 = vmatpush1.bf16.msra.mxu0 0
  %218 = vmatprep.subr.bf16.mxu0 0
  %219 = vmatpush1.bf16.msra.mxu0 0
  %220 = vmatprep.subr.bf16.mxu0 0
  %221 = vmatpush1.bf16.msra.mxu0 0
  %222 = vmatprep.mubr.bf16.mxu0 0
  %223 = vmatmul.mubr.bf16.gmra.mrb[0].mxu0 %v163
  %v224 = vpop.f32.mrb[0].mxu0
  %v225 = vadd.f32 0.0, %v224
  %v226 = vpop.f32.mrb[0].mxu0
  %v227 = vadd.f32 0.0, %v226
  %v228 = vpop.f32.mrb[0].mxu0
  %v229 = vpop.f32.mrb[0].mxu0
  %230 = vdwg.mxu0
  %231 = vmatprep.subr.bf16.mxu0 %v176
  %232 = vmatpush1.bf16.msra.mxu0 %v173
  %233 = vmatprep.subr.bf16.mxu0 0
  %234 = vmatpush1.bf16.msra.mxu0 0
  %235 = vmatprep.subr.bf16.mxu0 0
  %236 = vmatpush1.bf16.msra.mxu0 0
  %237 = vmatprep.subr.bf16.mxu0 0
  %238 = vmatpush1.bf16.msra.mxu0 0
  %239 = vmatprep.subr.bf16.mxu0 0
  %240 = vmatpush1.bf16.msra.mxu0 0
  %241 = vmatprep.subr.bf16.mxu0 0
  %242 = vmatpush1.bf16.msra.mxu0 0
  %243 = vmatprep.subr.bf16.mxu0 0
  %244 = vmatpush1.bf16.msra.mxu0 0
  %245 = vmatprep.subr.bf16.mxu0 0
  %246 = vmatpush1.bf16.msra.mxu0 0
  %247 = vmatprep.subr.bf16.mxu0 0
  %248 = vmatpush1.bf16.msra.mxu0 0
  %249 = vmatprep.subr.bf16.mxu0 0
  %250 = vmatpush1.bf16.msra.mxu0 0
  %251 = vmatprep.subr.bf16.mxu0 0
  %252 = vmatpush1.bf16.msra.mxu0 0
  %253 = vmatprep.subr.bf16.mxu0 0
  %254 = vmatpush1.bf16.msra.mxu0 0
  %255 = vmatprep.subr.bf16.mxu0 0
  %256 = vmatpush1.bf16.msra.mxu0 0
  %257 = vmatprep.subr.bf16.mxu0 0
  %258 = vmatpush1.bf16.msra.mxu0 0
  %259 = vmatprep.subr.bf16.mxu0 0
  %260 = vmatpush1.bf16.msra.mxu0 0
  %261 = vmatprep.subr.bf16.mxu0 0
  %262 = vmatpush1.bf16.msra.mxu0 0
  %263 = vmatprep.mubr.bf16.mxu0 0
  %264 = vmatmul.mubr.bf16.gmra.mrb[0].mxu0 %v163
  %v265 = vpop.f32.mrb[0].mxu0
  %v266 = vadd.f32 0.0, %v265
  %v267 = vpop.f32.mrb[0].mxu0
  %v268 = vadd.f32 0.0, %v267
  %v269 = vpop.f32.mrb[0].mxu0
  %v270 = vpop.f32.mrb[0].mxu0
  %271 = vdwg.mxu0
  %272 = vmatprep.subr.bf16.mxu0 %v182
  %273 = vmatpush1.bf16.msra.mxu0 %v179
  %274 = vmatprep.subr.bf16.mxu0 0
  %275 = vmatpush1.bf16.msra.mxu0 0
  %276 = vmatprep.subr.bf16.mxu0 0
  %277 = vmatpush1.bf16.msra.mxu0 0
  %278 = vmatprep.subr.bf16.mxu0 0
  %279 = vmatpush1.bf16.msra.mxu0 0
  %280 = vmatprep.subr.bf16.mxu0 0
  %281 = vmatpush1.bf16.msra.mxu0 0
  %282 = vmatprep.subr.bf16.mxu0 0
  %283 = vmatpush1.bf16.msra.mxu0 0
  %284 = vmatprep.subr.bf16.mxu0 0
  %285 = vmatpush1.bf16.msra.mxu0 0
  %286 = vmatprep.subr.bf16.mxu0 0
  %287 = vmatpush1.bf16.msra.mxu0 0
  %288 = vmatprep.subr.bf16.mxu0 0
  %289 = vmatpush1.bf16.msra.mxu0 0
  %290 = vmatprep.subr.bf16.mxu0 0
  %291 = vmatpush1.bf16.msra.mxu0 0
  %292 = vmatprep.subr.bf16.mxu0 0
  %293 = vmatpush1.bf16.msra.mxu0 0
  %294 = vmatprep.subr.bf16.mxu0 0
  %295 = vmatpush1.bf16.msra.mxu0 0
  %296 = vmatprep.subr.bf16.mxu0 0
  %297 = vmatpush1.bf16.msra.mxu0 0
  %298 = vmatprep.subr.bf16.mxu0 0
  %299 = vmatpush1.bf16.msra.mxu0 0
  %300 = vmatprep.subr.bf16.mxu0 0
  %301 = vmatpush1.bf16.msra.mxu0 0
  %302 = vmatprep.subr.bf16.mxu0 0
  %303 = vmatpush1.bf16.msra.mxu0 0
  %304 = vmatprep.mubr.bf16.mxu0 0
  %305 = vmatmul.mubr.bf16.gmra.mrb[0].mxu0 %v163
  %v306 = vpop.f32.mrb[0].mxu0
  %v307 = vadd.f32 0.0, %v306
  %v308 = vpop.f32.mrb[0].mxu0
  %v309 = vadd.f32 0.0, %v308
  %v310 = vpop.f32.mrb[0].mxu0
  %v311 = vpop.f32.mrb[0].mxu0
  %312 = vdwg.mxu0
  %313 = vmatprep.subr.bf16.mxu0 %v188
  %314 = vmatpush1.bf16.msra.mxu0 %v185
  %315 = vmatprep.subr.bf16.mxu0 0
  %316 = vmatpush1.bf16.msra.mxu0 0
  %317 = vmatprep.subr.bf16.mxu0 0
  %318 = vmatpush1.bf16.msra.mxu0 0
  %319 = vmatprep.subr.bf16.mxu0 0
  %320 = vmatpush1.bf16.msra.mxu0 0
  %321 = vmatprep.subr.bf16.mxu0 0
  %322 = vmatpush1.bf16.msra.mxu0 0
  %323 = vmatprep.subr.bf16.mxu0 0
  %324 = vmatpush1.bf16.msra.mxu0 0
  %325 = vmatprep.subr.bf16.mxu0 0
  %326 = vmatpush1.bf16.msra.mxu0 0
  %327 = vmatprep.subr.bf16.mxu0 0
  %328 = vmatpush1.bf16.msra.mxu0 0
  %329 = vmatprep.subr.bf16.mxu0 0
  %330 = vmatpush1.bf16.msra.mxu0 0
  %331 = vmatprep.subr.bf16.mxu0 0
  %332 = vmatpush1.bf16.msra.mxu0 0
  %333 = vmatprep.subr.bf16.mxu0 0
  %334 = vmatpush1.bf16.msra.mxu0 0
  %335 = vmatprep.subr.bf16.mxu0 0
  %336 = vmatpush1.bf16.msra.mxu0 0
  %337 = vmatprep.subr.bf16.mxu0 0
  %338 = vmatpush1.bf16.msra.mxu0 0
  %339 = vmatprep.subr.bf16.mxu0 0
  %340 = vmatpush1.bf16.msra.mxu0 0
  %341 = vmatprep.subr.bf16.mxu0 0
  %342 = vmatpush1.bf16.msra.mxu0 0
  %343 = vmatprep.subr.bf16.mxu0 0
  %344 = vmatpush1.bf16.msra.mxu0 0
  %345 = vmatprep.mubr.bf16.mxu0 0
  %346 = vmatmul.mubr.bf16.gmra.mrb[0].mxu0 %v163
  %v347 = vpop.f32.mrb[0].mxu0
  %v348 = vadd.f32 0.0, %v347
  %v349 = vpop.f32.mrb[0].mxu0
  %v350 = vadd.f32 0.0, %v349
  %v351 = vpop.f32.mrb[0].mxu0
  %v352 = vpop.f32.mrb[0].mxu0
  %353 = vdwg.mxu0
  %354 = vrot.lane.b32.xlu0 %v125, 111
  %v355 = vpop.permute.xlu0 %354
  %356 = vrot.lane.b32.xlu0 %v126, 111
  %v357 = vpop.permute.xlu0 %356
  %358 = vrot.lane.b32.xlu0 %v127, 111
  %v359 = vpop.permute.xlu0 %358
  %360 = vrot.lane.b32.xlu0 %v128, 111
  %v361 = vpop.permute.xlu0 %360
  %362 = vrot.lane.b32.xlu0 %v129, 111
  %v363 = vpop.permute.xlu0 %362
  %364 = vrot.lane.b32.xlu0 %v130, 111
  %v365 = vpop.permute.xlu0 %364
  %366 = vrot.lane.b32.xlu0 %v131, 111
  %v367 = vpop.permute.xlu0 %366
  %368 = vrot.lane.b32.xlu0 %v132, 111
  %v369 = vpop.permute.xlu0 %368
  %370 = vrot.lane.b32.xlu0 %v133, 111
  %v371 = vpop.permute.xlu0 %370
  %vm372 = vcmask 908288
  %v373 = vsel %vm372, %v355, %v357
  %v374 = vsel %vm372, %v357, %v359
  %v375 = vsel %vm372, %v359, %v361
  %v376 = vsel %vm372, %v361, %v363
  %v377 = vsel %vm372, %v363, %v365
  %v378 = vsel %vm372, %v365, %v367
  %v379 = vsel %vm372, %v367, %v369
  %v380 = vsel %vm372, %v369, %v371
  %v382 = vsel %vm161, %v79, 0
  %v385 = vsel %vm165, %v373, 0
  %v388 = vsel %vm165, %v374, 0
  %v391 = vsel %vm165, %v375, 0
  %v394 = vsel %vm165, %v376, 0
  %v397 = vsel %vm165, %v377, 0
  %v400 = vsel %vm165, %v378, 0
  %v403 = vsel %vm165, %v379, 0
  %v406 = vsel %vm165, %v380, 0
  %408 = vmatprep.subr.bf16.mxu0 %v388
  %409 = vmatpush1.bf16.msra.mxu0 %v385
  %410 = vmatprep.subr.bf16.mxu0 0
  %411 = vmatpush1.bf16.msra.mxu0 0
  %412 = vmatprep.subr.bf16.mxu0 0
  %413 = vmatpush1.bf16.msra.mxu0 0
  %414 = vmatprep.subr.bf16.mxu0 0
  %415 = vmatpush1.bf16.msra.mxu0 0
  %416 = vmatprep.subr.bf16.mxu0 0
  %417 = vmatpush1.bf16.msra.mxu0 0
  %418 = vmatprep.subr.bf16.mxu0 0
  %419 = vmatpush1.bf16.msra.mxu0 0
  %420 = vmatprep.subr.bf16.mxu0 0
  %421 = vmatpush1.bf16.msra.mxu0 0
  %422 = vmatprep.subr.bf16.mxu0 0
  %423 = vmatpush1.bf16.msra.mxu0 0
  %424 = vmatprep.subr.bf16.mxu0 0
  %425 = vmatpush1.bf16.msra.mxu0 0
  %426 = vmatprep.subr.bf16.mxu0 0
  %427 = vmatpush1.bf16.msra.mxu0 0
  %428 = vmatprep.subr.bf16.mxu0 0
  %429 = vmatpush1.bf16.msra.mxu0 0
  %430 = vmatprep.subr.bf16.mxu0 0
  %431 = vmatpush1.bf16.msra.mxu0 0
  %432 = vmatprep.subr.bf16.mxu0 0
  %433 = vmatpush1.bf16.msra.mxu0 0
  %434 = vmatprep.subr.bf16.mxu0 0
  %435 = vmatpush1.bf16.msra.mxu0 0
  %436 = vmatprep.subr.bf16.mxu0 0
  %437 = vmatpush1.bf16.msra.mxu0 0
  %438 = vmatprep.subr.bf16.mxu0 0
  %439 = vmatpush1.bf16.msra.mxu0 0
  %440 = vmatprep.mubr.bf16.mxu0 0
  %441 = vmatmul.mubr.bf16.gmra.mrb[0].mxu0 %v382
  %v442 = vpop.f32.mrb[0].mxu0
  %v443 = vadd.f32 %v225, %v442
  %v444 = vpop.f32.mrb[0].mxu0
  %v445 = vadd.f32 %v227, %v444
  %v446 = vpop.f32.mrb[0].mxu0
  %v447 = vpop.f32.mrb[0].mxu0
  %448 = vdwg.mxu0
  %449 = vmatprep.subr.bf16.mxu0 %v394
  %450 = vmatpush1.bf16.msra.mxu0 %v391
  %451 = vmatprep.subr.bf16.mxu0 0
  %452 = vmatpush1.bf16.msra.mxu0 0
  %453 = vmatprep.subr.bf16.mxu0 0
  %454 = vmatpush1.bf16.msra.mxu0 0
  %455 = vmatprep.subr.bf16.mxu0 0
  %456 = vmatpush1.bf16.msra.mxu0 0
  %457 = vmatprep.subr.bf16.mxu0 0
  %458 = vmatpush1.bf16.msra.mxu0 0
  %459 = vmatprep.subr.bf16.mxu0 0
  %460 = vmatpush1.bf16.msra.mxu0 0
  %461 = vmatprep.subr.bf16.mxu0 0
  %462 = vmatpush1.bf16.msra.mxu0 0
  %463 = vmatprep.subr.bf16.mxu0 0
  %464 = vmatpush1.bf16.msra.mxu0 0
  %465 = vmatprep.subr.bf16.mxu0 0
  %466 = vmatpush1.bf16.msra.mxu0 0
  %467 = vmatprep.subr.bf16.mxu0 0
  %468 = vmatpush1.bf16.msra.mxu0 0
  %469 = vmatprep.subr.bf16.mxu0 0
  %470 = vmatpush1.bf16.msra.mxu0 0
  %471 = vmatprep.subr.bf16.mxu0 0
  %472 = vmatpush1.bf16.msra.mxu0 0
  %473 = vmatprep.subr.bf16.mxu0 0
  %474 = vmatpush1.bf16.msra.mxu0 0
  %475 = vmatprep.subr.bf16.mxu0 0
  %476 = vmatpush1.bf16.msra.mxu0 0
  %477 = vmatprep.subr.bf16.mxu0 0
  %478 = vmatpush1.bf16.msra.mxu0 0
  %479 = vmatprep.subr.bf16.mxu0 0
  %480 = vmatpush1.bf16.msra.mxu0 0
  %481 = vmatprep.mubr.bf16.mxu0 0
  %482 = vmatmul.mubr.bf16.gmra.mrb[0].mxu0 %v382
  %v483 = vpop.f32.mrb[0].mxu0
  %v484 = vadd.f32 %v266, %v483
  %v485 = vpop.f32.mrb[0].mxu0
  %v486 = vadd.f32 %v268, %v485
  %v487 = vpop.f32.mrb[0].mxu0
  %v488 = vpop.f32.mrb[0].mxu0
  %489 = vdwg.mxu0
  %490 = vmatprep.subr.bf16.mxu0 %v400
  %491 = vmatpush1.bf16.msra.mxu0 %v397
  %492 = vmatprep.subr.bf16.mxu0 0
  %493 = vmatpush1.bf16.msra.mxu0 0
  %494 = vmatprep.subr.bf16.mxu0 0
  %495 = vmatpush1.bf16.msra.mxu0 0
  %496 = vmatprep.subr.bf16.mxu0 0
  %497 = vmatpush1.bf16.msra.mxu0 0
  %498 = vmatprep.subr.bf16.mxu0 0
  %499 = vmatpush1.bf16.msra.mxu0 0
  %500 = vmatprep.subr.bf16.mxu0 0
  %501 = vmatpush1.bf16.msra.mxu0 0
  %502 = vmatprep.subr.bf16.mxu0 0
  %503 = vmatpush1.bf16.msra.mxu0 0
  %504 = vmatprep.subr.bf16.mxu0 0
  %505 = vmatpush1.bf16.msra.mxu0 0
  %506 = vmatprep.subr.bf16.mxu0 0
  %507 = vmatpush1.bf16.msra.mxu0 0
  %508 = vmatprep.subr.bf16.mxu0 0
  %509 = vmatpush1.bf16.msra.mxu0 0
  %510 = vmatprep.subr.bf16.mxu0 0
  %511 = vmatpush1.bf16.msra.mxu0 0
  %512 = vmatprep.subr.bf16.mxu0 0
  %513 = vmatpush1.bf16.msra.mxu0 0
  %514 = vmatprep.subr.bf16.mxu0 0
  %515 = vmatpush1.bf16.msra.mxu0 0
  %516 = vmatprep.subr.bf16.mxu0 0
  %517 = vmatpush1.bf16.msra.mxu0 0
  %518 = vmatprep.subr.bf16.mxu0 0
  %519 = vmatpush1.bf16.msra.mxu0 0
  %520 = vmatprep.subr.bf16.mxu0 0
  %521 = vmatpush1.bf16.msra.mxu0 0
  %522 = vmatprep.mubr.bf16.mxu0 0
  %523 = vmatmul.mubr.bf16.gmra.mrb[0].mxu0 %v382
  %v524 = vpop.f32.mrb[0].mxu0
  %v525 = vadd.f32 %v307, %v524
  %v526 = vpop.f32.mrb[0].mxu0
  %v527 = vadd.f32 %v309, %v526
  %v528 = vpop.f32.mrb[0].mxu0
  %v529 = vpop.f32.mrb[0].mxu0
  %530 = vdwg.mxu0
  %531 = vmatprep.subr.bf16.mxu0 %v406
  %532 = vmatpush1.bf16.msra.mxu0 %v403
  %533 = vmatprep.subr.bf16.mxu0 0
  %534 = vmatpush1.bf16.msra.mxu0 0
  %535 = vmatprep.subr.bf16.mxu0 0
  %536 = vmatpush1.bf16.msra.mxu0 0
  %537 = vmatprep.subr.bf16.mxu0 0
  %538 = vmatpush1.bf16.msra.mxu0 0
  %539 = vmatprep.subr.bf16.mxu0 0
  %540 = vmatpush1.bf16.msra.mxu0 0
  %541 = vmatprep.subr.bf16.mxu0 0
  %542 = vmatpush1.bf16.msra.mxu0 0
  %543 = vmatprep.subr.bf16.mxu0 0
  %544 = vmatpush1.bf16.msra.mxu0 0
  %545 = vmatprep.subr.bf16.mxu0 0
  %546 = vmatpush1.bf16.msra.mxu0 0
  %547 = vmatprep.subr.bf16.mxu0 0
  %548 = vmatpush1.bf16.msra.mxu0 0
  %549 = vmatprep.subr.bf16.mxu0 0
  %550 = vmatpush1.bf16.msra.mxu0 0
  %551 = vmatprep.subr.bf16.mxu0 0
  %552 = vmatpush1.bf16.msra.mxu0 0
  %553 = vmatprep.subr.bf16.mxu0 0
  %554 = vmatpush1.bf16.msra.mxu0 0
  %555 = vmatprep.subr.bf16.mxu0 0
  %556 = vmatpush1.bf16.msra.mxu0 0
  %557 = vmatprep.subr.bf16.mxu0 0
  %558 = vmatpush1.bf16.msra.mxu0 0
  %559 = vmatprep.subr.bf16.mxu0 0
  %560 = vmatpush1.bf16.msra.mxu0 0
  %561 = vmatprep.subr.bf16.mxu0 0
  %562 = vmatpush1.bf16.msra.mxu0 0
  %563 = vmatprep.mubr.bf16.mxu0 0
  %564 = vmatmul.mubr.bf16.gmra.mrb[0].mxu0 %v382
  %v565 = vpop.f32.mrb[0].mxu0
  %v566 = vadd.f32 %v348, %v565
  %v567 = vpop.f32.mrb[0].mxu0
  %v568 = vadd.f32 %v350, %v567
  %v569 = vpop.f32.mrb[0].mxu0
  %v570 = vpop.f32.mrb[0].mxu0
  %571 = vdwg.mxu0
  %572 = vrot.lane.b32.xlu0 %v125, 109
  %v573 = vpop.permute.xlu0 %572
  %574 = vrot.lane.b32.xlu0 %v126, 109
  %v575 = vpop.permute.xlu0 %574
  %576 = vrot.lane.b32.xlu0 %v127, 109
  %v577 = vpop.permute.xlu0 %576
  %578 = vrot.lane.b32.xlu0 %v128, 109
  %v579 = vpop.permute.xlu0 %578
  %580 = vrot.lane.b32.xlu0 %v129, 109
  %v581 = vpop.permute.xlu0 %580
  %582 = vrot.lane.b32.xlu0 %v130, 109
  %v583 = vpop.permute.xlu0 %582
  %584 = vrot.lane.b32.xlu0 %v131, 109
  %v585 = vpop.permute.xlu0 %584
  %586 = vrot.lane.b32.xlu0 %v132, 109
  %v587 = vpop.permute.xlu0 %586
  %588 = vrot.lane.b32.xlu0 %v133, 109
  %v589 = vpop.permute.xlu0 %588
  %vm590 = vcmask 891904
  %v591 = vsel %vm590, %v573, %v575
  %v592 = vsel %vm590, %v575, %v577
  %v593 = vsel %vm590, %v577, %v579
  %v594 = vsel %vm590, %v579, %v581
  %v595 = vsel %vm590, %v581, %v583
  %v596 = vsel %vm590, %v583, %v585
  %v597 = vsel %vm590, %v585, %v587
  %v598 = vsel %vm590, %v587, %v589
  %v600 = vsel %vm161, %v81, 0
  %v603 = vsel %vm165, %v591, 0
  %v606 = vsel %vm165, %v592, 0
  %v609 = vsel %vm165, %v593, 0
  %v612 = vsel %vm165, %v594, 0
  %v615 = vsel %vm165, %v595, 0
  %v618 = vsel %vm165, %v596, 0
  %v621 = vsel %vm165, %v597, 0
  %v624 = vsel %vm165, %v598, 0
  %626 = vmatprep.subr.bf16.mxu0 %v606
  %627 = vmatpush1.bf16.msra.mxu0 %v603
  %628 = vmatprep.subr.bf16.mxu0 0
  %629 = vmatpush1.bf16.msra.mxu0 0
  %630 = vmatprep.subr.bf16.mxu0 0
  %631 = vmatpush1.bf16.msra.mxu0 0
  %632 = vmatprep.subr.bf16.mxu0 0
  %633 = vmatpush1.bf16.msra.mxu0 0
  %634 = vmatprep.subr.bf16.mxu0 0
  %635 = vmatpush1.bf16.msra.mxu0 0
  %636 = vmatprep.subr.bf16.mxu0 0
  %637 = vmatpush1.bf16.msra.mxu0 0
  %638 = vmatprep.subr.bf16.mxu0 0
  %639 = vmatpush1.bf16.msra.mxu0 0
  %640 = vmatprep.subr.bf16.mxu0 0
  %641 = vmatpush1.bf16.msra.mxu0 0
  %642 = vmatprep.subr.bf16.mxu0 0
  %643 = vmatpush1.bf16.msra.mxu0 0
  %644 = vmatprep.subr.bf16.mxu0 0
  %645 = vmatpush1.bf16.msra.mxu0 0
  %646 = vmatprep.subr.bf16.mxu0 0
  %647 = vmatpush1.bf16.msra.mxu0 0
  %648 = vmatprep.subr.bf16.mxu0 0
  %649 = vmatpush1.bf16.msra.mxu0 0
  %650 = vmatprep.subr.bf16.mxu0 0
  %651 = vmatpush1.bf16.msra.mxu0 0
  %652 = vmatprep.subr.bf16.mxu0 0
  %653 = vmatpush1.bf16.msra.mxu0 0
  %654 = vmatprep.subr.bf16.mxu0 0
  %655 = vmatpush1.bf16.msra.mxu0 0
  %656 = vmatprep.subr.bf16.mxu0 0
  %657 = vmatpush1.bf16.msra.mxu0 0
  %658 = vmatprep.mubr.bf16.mxu0 0
  %659 = vmatmul.mubr.bf16.gmra.mrb[0].mxu0 %v600
  %v660 = vpop.f32.mrb[0].mxu0
  %v661 = vadd.f32 0.0, %v660
  %v662 = vpop.f32.mrb[0].mxu0
  %v663 = vadd.f32 0.0, %v662
  %v664 = vpop.f32.mrb[0].mxu0
  %v665 = vpop.f32.mrb[0].mxu0
  %666 = vdwg.mxu0
  %667 = vmatprep.subr.bf16.mxu0 %v612
  %668 = vmatpush1.bf16.msra.mxu0 %v609
  %669 = vmatprep.subr.bf16.mxu0 0
  %670 = vmatpush1.bf16.msra.mxu0 0
  %671 = vmatprep.subr.bf16.mxu0 0
  %672 = vmatpush1.bf16.msra.mxu0 0
  %673 = vmatprep.subr.bf16.mxu0 0
  %674 = vmatpush1.bf16.msra.mxu0 0
  %675 = vmatprep.subr.bf16.mxu0 0
  %676 = vmatpush1.bf16.msra.mxu0 0
  %677 = vmatprep.subr.bf16.mxu0 0
  %678 = vmatpush1.bf16.msra.mxu0 0
  %679 = vmatprep.subr.bf16.mxu0 0
  %680 = vmatpush1.bf16.msra.mxu0 0
  %681 = vmatprep.subr.bf16.mxu0 0
  %682 = vmatpush1.bf16.msra.mxu0 0
  %683 = vmatprep.subr.bf16.mxu0 0
  %684 = vmatpush1.bf16.msra.mxu0 0
  %685 = vmatprep.subr.bf16.mxu0 0
  %686 = vmatpush1.bf16.msra.mxu0 0
  %687 = vmatprep.subr.bf16.mxu0 0
  %688 = vmatpush1.bf16.msra.mxu0 0
  %689 = vmatprep.subr.bf16.mxu0 0
  %690 = vmatpush1.bf16.msra.mxu0 0
  %691 = vmatprep.subr.bf16.mxu0 0
  %692 = vmatpush1.bf16.msra.mxu0 0
  %693 = vmatprep.subr.bf16.mxu0 0
  %694 = vmatpush1.bf16.msra.mxu0 0
  %695 = vmatprep.subr.bf16.mxu0 0
  %696 = vmatpush1.bf16.msra.mxu0 0
  %697 = vmatprep.subr.bf16.mxu0 0
  %698 = vmatpush1.bf16.msra.mxu0 0
  %699 = vmatprep.mubr.bf16.mxu0 0
  %700 = vmatmul.mubr.bf16.gmra.mrb[0].mxu0 %v600
  %v701 = vpop.f32.mrb[0].mxu0
  %v702 = vadd.f32 0.0, %v701
  %v703 = vpop.f32.mrb[0].mxu0
  %v704 = vadd.f32 0.0, %v703
  %v705 = vpop.f32.mrb[0].mxu0
  %v706 = vpop.f32.mrb[0].mxu0
  %707 = vdwg.mxu0
  %708 = vmatprep.subr.bf16.mxu0 %v618
  %709 = vmatpush1.bf16.msra.mxu0 %v615
  %710 = vmatprep.subr.bf16.mxu0 0
  %711 = vmatpush1.bf16.msra.mxu0 0
  %712 = vmatprep.subr.bf16.mxu0 0
  %713 = vmatpush1.bf16.msra.mxu0 0
  %714 = vmatprep.subr.bf16.mxu0 0
  %715 = vmatpush1.bf16.msra.mxu0 0
  %716 = vmatprep.subr.bf16.mxu0 0
  %717 = vmatpush1.bf16.msra.mxu0 0
  %718 = vmatprep.subr.bf16.mxu0 0
  %719 = vmatpush1.bf16.msra.mxu0 0
  %720 = vmatprep.subr.bf16.mxu0 0
  %721 = vmatpush1.bf16.msra.mxu0 0
  %722 = vmatprep.subr.bf16.mxu0 0
  %723 = vmatpush1.bf16.msra.mxu0 0
  %724 = vmatprep.subr.bf16.mxu0 0
  %725 = vmatpush1.bf16.msra.mxu0 0
  %726 = vmatprep.subr.bf16.mxu0 0
  %727 = vmatpush1.bf16.msra.mxu0 0
  %728 = vmatprep.subr.bf16.mxu0 0
  %729 = vmatpush1.bf16.msra.mxu0 0
  %730 = vmatprep.subr.bf16.mxu0 0
  %731 = vmatpush1.bf16.msra.mxu0 0
  %732 = vmatprep.subr.bf16.mxu0 0
  %733 = vmatpush1.bf16.msra.mxu0 0
  %734 = vmatprep.subr.bf16.mxu0 0
  %735 = vmatpush1.bf16.msra.mxu0 0
  %736 = vmatprep.subr.bf16.mxu0 0
  %737 = vmatpush1.bf16.msra.mxu0 0
  %738 = vmatprep.subr.bf16.mxu0 0
  %739 = vmatpush1.bf16.msra.mxu0 0
  %740 = vmatprep.mubr.bf16.mxu0 0
  %741 = vmatmul.mubr.bf16.gmra.mrb[0].mxu0 %v600
  %v742 = vpop.f32.mrb[0].mxu0
  %v743 = vadd.f32 0.0, %v742
  %v744 = vpop.f32.mrb[0].mxu0
  %v745 = vadd.f32 0.0, %v744
  %v746 = vpop.f32.mrb[0].mxu0
  %v747 = vpop.f32.mrb[0].mxu0
  %748 = vdwg.mxu0
  %749 = vmatprep.subr.bf16.mxu0 %v624
  %750 = vmatpush1.bf16.msra.mxu0 %v621
  %751 = vmatprep.subr.bf16.mxu0 0
  %752 = vmatpush1.bf16.msra.mxu0 0
  %753 = vmatprep.subr.bf16.mxu0 0
  %754 = vmatpush1.bf16.msra.mxu0 0
  %755 = vmatprep.subr.bf16.mxu0 0
  %756 = vmatpush1.bf16.msra.mxu0 0
  %757 = vmatprep.subr.bf16.mxu0 0
  %758 = vmatpush1.bf16.msra.mxu0 0
  %759 = vmatprep.subr.bf16.mxu0 0
  %760 = vmatpush1.bf16.msra.mxu0 0
  %761 = vmatprep.subr.bf16.mxu0 0
  %762 = vmatpush1.bf16.msra.mxu0 0
  %763 = vmatprep.subr.bf16.mxu0 0
  %764 = vmatpush1.bf16.msra.mxu0 0
  %765 = vmatprep.subr.bf16.mxu0 0
  %766 = vmatpush1.bf16.msra.mxu0 0
  %767 = vmatprep.subr.bf16.mxu0 0
  %768 = vmatpush1.bf16.msra.mxu0 0
  %769 = vmatprep.subr.bf16.mxu0 0
  %770 = vmatpush1.bf16.msra.mxu0 0
  %771 = vmatprep.subr.bf16.mxu0 0
  %772 = vmatpush1.bf16.msra.mxu0 0
  %773 = vmatprep.subr.bf16.mxu0 0
  %774 = vmatpush1.bf16.msra.mxu0 0
  %775 = vmatprep.subr.bf16.mxu0 0
  %776 = vmatpush1.bf16.msra.mxu0 0
  %777 = vmatprep.subr.bf16.mxu0 0
  %778 = vmatpush1.bf16.msra.mxu0 0
  %779 = vmatprep.subr.bf16.mxu0 0
  %780 = vmatpush1.bf16.msra.mxu0 0
  %781 = vmatprep.mubr.bf16.mxu0 0
  %782 = vmatmul.mubr.bf16.gmra.mrb[0].mxu0 %v600
  %v783 = vpop.f32.mrb[0].mxu0
  %v784 = vadd.f32 0.0, %v783
  %v785 = vpop.f32.mrb[0].mxu0
  %v786 = vadd.f32 0.0, %v785
  %v787 = vpop.f32.mrb[0].mxu0
  %v788 = vpop.f32.mrb[0].mxu0
  %789 = vdwg.mxu0
  %v790 = vadd.f32 %v443, %v661
  %v791 = vadd.f32 %v445, %v663
  %v792 = vadd.f32 %v484, %v702
  %v793 = vadd.f32 %v486, %v704
  %v794 = vadd.f32 %v525, %v743
  %v795 = vadd.f32 %v527, %v745
  %v796 = vadd.f32 %v566, %v784
  %v797 = vadd.f32 %v568, %v786
  %798 = vrot.lane.b32.xlu0 %v125, 101
  %v799 = vpop.permute.xlu0 %798
  %800 = vrot.lane.b32.xlu0 %v126, 101
  %v801 = vpop.permute.xlu0 %800
  %802 = vrot.lane.b32.xlu0 %v127, 101
  %v803 = vpop.permute.xlu0 %802
  %804 = vrot.lane.b32.xlu0 %v128, 101
  %v805 = vpop.permute.xlu0 %804
  %806 = vrot.lane.b32.xlu0 %v129, 101
  %v807 = vpop.permute.xlu0 %806
  %808 = vrot.lane.b32.xlu0 %v130, 101
  %v809 = vpop.permute.xlu0 %808
  %810 = vrot.lane.b32.xlu0 %v131, 101
  %v811 = vpop.permute.xlu0 %810
  %812 = vrot.lane.b32.xlu0 %v132, 101
  %v813 = vpop.permute.xlu0 %812
  %814 = vrot.lane.b32.xlu0 %v133, 101
  %v815 = vpop.permute.xlu0 %814
  %vm816 = vcmask 826368
  %v817 = vsel %vm816, %v799, %v801
  %v818 = vsel %vm816, %v801, %v803
  %v819 = vsel %vm816, %v803, %v805
  %v820 = vsel %vm816, %v805, %v807
  %v821 = vsel %vm816, %v807, %v809
  %v822 = vsel %vm816, %v809, %v811
  %v823 = vsel %vm816, %v811, %v813
  %v824 = vsel %vm816, %v813, %v815
  %v826 = vsel %vm161, %v82, 0
  %v829 = vsel %vm165, %v817, 0
  %v832 = vsel %vm165, %v818, 0
  %v835 = vsel %vm165, %v819, 0
  %v838 = vsel %vm165, %v820, 0
  %v841 = vsel %vm165, %v821, 0
  %v844 = vsel %vm165, %v822, 0
  %v847 = vsel %vm165, %v823, 0
  %v850 = vsel %vm165, %v824, 0
  %852 = vmatprep.subr.bf16.mxu0 %v832
  %853 = vmatpush1.bf16.msra.mxu0 %v829
  %854 = vmatprep.subr.bf16.mxu0 0
  %855 = vmatpush1.bf16.msra.mxu0 0
  %856 = vmatprep.subr.bf16.mxu0 0
  %857 = vmatpush1.bf16.msra.mxu0 0
  %858 = vmatprep.subr.bf16.mxu0 0
  %859 = vmatpush1.bf16.msra.mxu0 0
  %860 = vmatprep.subr.bf16.mxu0 0
  %861 = vmatpush1.bf16.msra.mxu0 0
  %862 = vmatprep.subr.bf16.mxu0 0
  %863 = vmatpush1.bf16.msra.mxu0 0
  %864 = vmatprep.subr.bf16.mxu0 0
  %865 = vmatpush1.bf16.msra.mxu0 0
  %866 = vmatprep.subr.bf16.mxu0 0
  %867 = vmatpush1.bf16.msra.mxu0 0
  %868 = vmatprep.subr.bf16.mxu0 0
  %869 = vmatpush1.bf16.msra.mxu0 0
  %870 = vmatprep.subr.bf16.mxu0 0
  %871 = vmatpush1.bf16.msra.mxu0 0
  %872 = vmatprep.subr.bf16.mxu0 0
  %873 = vmatpush1.bf16.msra.mxu0 0
  %874 = vmatprep.subr.bf16.mxu0 0
  %875 = vmatpush1.bf16.msra.mxu0 0
  %876 = vmatprep.subr.bf16.mxu0 0
  %877 = vmatpush1.bf16.msra.mxu0 0
  %878 = vmatprep.subr.bf16.mxu0 0
  %879 = vmatpush1.bf16.msra.mxu0 0
  %880 = vmatprep.subr.bf16.mxu0 0
  %881 = vmatpush1.bf16.msra.mxu0 0
  %882 = vmatprep.subr.bf16.mxu0 0
  %883 = vmatpush1.bf16.msra.mxu0 0
  %884 = vmatprep.mubr.bf16.mxu0 0
  %885 = vmatmul.mubr.bf16.gmra.mrb[0].mxu0 %v826
  %v886 = vpop.f32.mrb[0].mxu0
  %v887 = vadd.f32 0.0, %v886
  %v888 = vpop.f32.mrb[0].mxu0
  %v889 = vadd.f32 0.0, %v888
  %v890 = vpop.f32.mrb[0].mxu0
  %v891 = vpop.f32.mrb[0].mxu0
  %892 = vdwg.mxu0
  %893 = vmatprep.subr.bf16.mxu0 %v838
  %894 = vmatpush1.bf16.msra.mxu0 %v835
  %895 = vmatprep.subr.bf16.mxu0 0
  %896 = vmatpush1.bf16.msra.mxu0 0
  %897 = vmatprep.subr.bf16.mxu0 0
  %898 = vmatpush1.bf16.msra.mxu0 0
  %899 = vmatprep.subr.bf16.mxu0 0
  %900 = vmatpush1.bf16.msra.mxu0 0
  %901 = vmatprep.subr.bf16.mxu0 0
  %902 = vmatpush1.bf16.msra.mxu0 0
  %903 = vmatprep.subr.bf16.mxu0 0
  %904 = vmatpush1.bf16.msra.mxu0 0
  %905 = vmatprep.subr.bf16.mxu0 0
  %906 = vmatpush1.bf16.msra.mxu0 0
  %907 = vmatprep.subr.bf16.mxu0 0
  %908 = vmatpush1.bf16.msra.mxu0 0
  %909 = vmatprep.subr.bf16.mxu0 0
  %910 = vmatpush1.bf16.msra.mxu0 0
  %911 = vmatprep.subr.bf16.mxu0 0
  %912 = vmatpush1.bf16.msra.mxu0 0
  %913 = vmatprep.subr.bf16.mxu0 0
  %914 = vmatpush1.bf16.msra.mxu0 0
  %915 = vmatprep.subr.bf16.mxu0 0
  %916 = vmatpush1.bf16.msra.mxu0 0
  %917 = vmatprep.subr.bf16.mxu0 0
  %918 = vmatpush1.bf16.msra.mxu0 0
  %919 = vmatprep.subr.bf16.mxu0 0
  %920 = vmatpush1.bf16.msra.mxu0 0
  %921 = vmatprep.subr.bf16.mxu0 0
  %922 = vmatpush1.bf16.msra.mxu0 0
  %923 = vmatprep.subr.bf16.mxu0 0
  %924 = vmatpush1.bf16.msra.mxu0 0
  %925 = vmatprep.mubr.bf16.mxu0 0
  %926 = vmatmul.mubr.bf16.gmra.mrb[0].mxu0 %v826
  %v927 = vpop.f32.mrb[0].mxu0
  %v928 = vadd.f32 0.0, %v927
  %v929 = vpop.f32.mrb[0].mxu0
  %v930 = vadd.f32 0.0, %v929
  %v931 = vpop.f32.mrb[0].mxu0
  %v932 = vpop.f32.mrb[0].mxu0
  %933 = vdwg.mxu0
  %934 = vmatprep.subr.bf16.mxu0 %v844
  %935 = vmatpush1.bf16.msra.mxu0 %v841
  %936 = vmatprep.subr.bf16.mxu0 0
  %937 = vmatpush1.bf16.msra.mxu0 0
  %938 = vmatprep.subr.bf16.mxu0 0
  %939 = vmatpush1.bf16.msra.mxu0 0
  %940 = vmatprep.subr.bf16.mxu0 0
  %941 = vmatpush1.bf16.msra.mxu0 0
  %942 = vmatprep.subr.bf16.mxu0 0
  %943 = vmatpush1.bf16.msra.mxu0 0
  %944 = vmatprep.subr.bf16.mxu0 0
  %945 = vmatpush1.bf16.msra.mxu0 0
  %946 = vmatprep.subr.bf16.mxu0 0
  %947 = vmatpush1.bf16.msra.mxu0 0
  %948 = vmatprep.subr.bf16.mxu0 0
  %949 = vmatpush1.bf16.msra.mxu0 0
  %950 = vmatprep.subr.bf16.mxu0 0
  %951 = vmatpush1.bf16.msra.mxu0 0
  %952 = vmatprep.subr.bf16.mxu0 0
  %953 = vmatpush1.bf16.msra.mxu0 0
  %954 = vmatprep.subr.bf16.mxu0 0
  %955 = vmatpush1.bf16.msra.mxu0 0
  %956 = vmatprep.subr.bf16.mxu0 0
  %957 = vmatpush1.bf16.msra.mxu0 0
  %958 = vmatprep.subr.bf16.mxu0 0
  %959 = vmatpush1.bf16.msra.mxu0 0
  %960 = vmatprep.subr.bf16.mxu0 0
  %961 = vmatpush1.bf16.msra.mxu0 0
  %962 = vmatprep.subr.bf16.mxu0 0
  %963 = vmatpush1.bf16.msra.mxu0 0
  %964 = vmatprep.subr.bf16.mxu0 0
  %965 = vmatpush1.bf16.msra.mxu0 0
  %966 = vmatprep.mubr.bf16.mxu0 0
  %967 = vmatmul.mubr.bf16.gmra.mrb[0].mxu0 %v826
  %v968 = vpop.f32.mrb[0].mxu0
  %v969 = vadd.f32 0.0, %v968
  %v970 = vpop.f32.mrb[0].mxu0
  %v971 = vadd.f32 0.0, %v970
  %v972 = vpop.f32.mrb[0].mxu0
  %v973 = vpop.f32.mrb[0].mxu0
  %974 = vdwg.mxu0
  %975 = vmatprep.subr.bf16.mxu0 %v850
  %976 = vmatpush1.bf16.msra.mxu0 %v847
  %977 = vmatprep.subr.bf16.mxu0 0
  %978 = vmatpush1.bf16.msra.mxu0 0
  %979 = vmatprep.subr.bf16.mxu0 0
  %980 = vmatpush1.bf16.msra.mxu0 0
  %981 = vmatprep.subr.bf16.mxu0 0
  %982 = vmatpush1.bf16.msra.mxu0 0
  %983 = vmatprep.subr.bf16.mxu0 0
  %984 = vmatpush1.bf16.msra.mxu0 0
  %985 = vmatprep.subr.bf16.mxu0 0
  %986 = vmatpush1.bf16.msra.mxu0 0
  %987 = vmatprep.subr.bf16.mxu0 0
  %988 = vmatpush1.bf16.msra.mxu0 0
  %989 = vmatprep.subr.bf16.mxu0 0
  %990 = vmatpush1.bf16.msra.mxu0 0
  %991 = vmatprep.subr.bf16.mxu0 0
  %992 = vmatpush1.bf16.msra.mxu0 0
  %993 = vmatprep.subr.bf16.mxu0 0
  %994 = vmatpush1.bf16.msra.mxu0 0
  %995 = vmatprep.subr.bf16.mxu0 0
  %996 = vmatpush1.bf16.msra.mxu0 0
  %997 = vmatprep.subr.bf16.mxu0 0
  %998 = vmatpush1.bf16.msra.mxu0 0
  %999 = vmatprep.subr.bf16.mxu0 0
  %1000 = vmatpush1.bf16.msra.mxu0 0
  %1001 = vmatprep.subr.bf16.mxu0 0
  %1002 = vmatpush1.bf16.msra.mxu0 0
  %1003 = vmatprep.subr.bf16.mxu0 0
  %1004 = vmatpush1.bf16.msra.mxu0 0
  %1005 = vmatprep.subr.bf16.mxu0 0
  %1006 = vmatpush1.bf16.msra.mxu0 0
  %1007 = vmatprep.mubr.bf16.mxu0 0
  %1008 = vmatmul.mubr.bf16.gmra.mrb[0].mxu0 %v826
  %v1009 = vpop.f32.mrb[0].mxu0
  %v1010 = vadd.f32 0.0, %v1009
  %v1011 = vpop.f32.mrb[0].mxu0
  %v1012 = vadd.f32 0.0, %v1011
  %v1013 = vpop.f32.mrb[0].mxu0
  %v1014 = vpop.f32.mrb[0].mxu0
  %1015 = vdwg.mxu0
  %v1016 = vadd.f32 %v790, %v887
  %v1017 = vadd.f32 %v791, %v889
  %v1018 = vadd.f32 %v792, %v928
  %v1019 = vadd.f32 %v793, %v930
  %v1020 = vadd.f32 %v794, %v969
  %v1021 = vadd.f32 %v795, %v971
  %v1022 = vadd.f32 %v796, %v1010
  %v1023 = vadd.f32 %v797, %v1012
  %1024 = vrot.lane.b32.xlu0 %v125, 100
  %v1025 = vpop.permute.xlu0 %1024
  %1026 = vrot.lane.b32.xlu0 %v126, 100
  %v1027 = vpop.permute.xlu0 %1026
  %1028 = vrot.lane.b32.xlu0 %v127, 100
  %v1029 = vpop.permute.xlu0 %1028
  %1030 = vrot.lane.b32.xlu0 %v128, 100
  %v1031 = vpop.permute.xlu0 %1030
  %1032 = vrot.lane.b32.xlu0 %v129, 100
  %v1033 = vpop.permute.xlu0 %1032
  %1034 = vrot.lane.b32.xlu0 %v130, 100
  %v1035 = vpop.permute.xlu0 %1034
  %1036 = vrot.lane.b32.xlu0 %v131, 100
  %v1037 = vpop.permute.xlu0 %1036
  %1038 = vrot.lane.b32.xlu0 %v132, 100
  %v1039 = vpop.permute.xlu0 %1038
  %1040 = vrot.lane.b32.xlu0 %v133, 100
  %v1041 = vpop.permute.xlu0 %1040
  %vm1042 = vcmask 818176
  %v1043 = vsel %vm1042, %v1025, %v1027
  %v1044 = vsel %vm1042, %v1027, %v1029
  %v1045 = vsel %vm1042, %v1029, %v1031
  %v1046 = vsel %vm1042, %v1031, %v1033
  %v1047 = vsel %vm1042, %v1033, %v1035
  %v1048 = vsel %vm1042, %v1035, %v1037
  %v1049 = vsel %vm1042, %v1037, %v1039
  %v1050 = vsel %vm1042, %v1039, %v1041
  %v1052 = vsel %vm161, %v83, 0
  %v1055 = vsel %vm165, %v1043, 0
  %v1058 = vsel %vm165, %v1044, 0
  %v1061 = vsel %vm165, %v1045, 0
  %v1064 = vsel %vm165, %v1046, 0
  %v1067 = vsel %vm165, %v1047, 0
  %v1070 = vsel %vm165, %v1048, 0
  %v1073 = vsel %vm165, %v1049, 0
  %v1076 = vsel %vm165, %v1050, 0
  %1078 = vmatprep.subr.bf16.mxu0 %v1058
  %1079 = vmatpush1.bf16.msra.mxu0 %v1055
  %1080 = vmatprep.subr.bf16.mxu0 0
  %1081 = vmatpush1.bf16.msra.mxu0 0
  %1082 = vmatprep.subr.bf16.mxu0 0
  %1083 = vmatpush1.bf16.msra.mxu0 0
  %1084 = vmatprep.subr.bf16.mxu0 0
  %1085 = vmatpush1.bf16.msra.mxu0 0
  %1086 = vmatprep.subr.bf16.mxu0 0
  %1087 = vmatpush1.bf16.msra.mxu0 0
  %1088 = vmatprep.subr.bf16.mxu0 0
  %1089 = vmatpush1.bf16.msra.mxu0 0
  %1090 = vmatprep.subr.bf16.mxu0 0
  %1091 = vmatpush1.bf16.msra.mxu0 0
  %1092 = vmatprep.subr.bf16.mxu0 0
  %1093 = vmatpush1.bf16.msra.mxu0 0
  %1094 = vmatprep.subr.bf16.mxu0 0
  %1095 = vmatpush1.bf16.msra.mxu0 0
  %1096 = vmatprep.subr.bf16.mxu0 0
  %1097 = vmatpush1.bf16.msra.mxu0 0
  %1098 = vmatprep.subr.bf16.mxu0 0
  %1099 = vmatpush1.bf16.msra.mxu0 0
  %1100 = vmatprep.subr.bf16.mxu0 0
  %1101 = vmatpush1.bf16.msra.mxu0 0
  %1102 = vmatprep.subr.bf16.mxu0 0
  %1103 = vmatpush1.bf16.msra.mxu0 0
  %1104 = vmatprep.subr.bf16.mxu0 0
  %1105 = vmatpush1.bf16.msra.mxu0 0
  %1106 = vmatprep.subr.bf16.mxu0 0
  %1107 = vmatpush1.bf16.msra.mxu0 0
  %1108 = vmatprep.subr.bf16.mxu0 0
  %1109 = vmatpush1.bf16.msra.mxu0 0
  %1110 = vmatprep.mubr.bf16.mxu0 0
  %1111 = vmatmul.mubr.bf16.gmra.mrb[0].mxu0 %v1052
  %v1112 = vpop.f32.mrb[0].mxu0
  %v1113 = vadd.f32 0.0, %v1112
  %v1114 = vpop.f32.mrb[0].mxu0
  %v1115 = vadd.f32 0.0, %v1114
  %v1116 = vpop.f32.mrb[0].mxu0
  %v1117 = vpop.f32.mrb[0].mxu0
  %1118 = vdwg.mxu0
  %1119 = vmatprep.subr.bf16.mxu0 %v1064
  %1120 = vmatpush1.bf16.msra.mxu0 %v1061
  %1121 = vmatprep.subr.bf16.mxu0 0
  %1122 = vmatpush1.bf16.msra.mxu0 0
  %1123 = vmatprep.subr.bf16.mxu0 0
  %1124 = vmatpush1.bf16.msra.mxu0 0
  %1125 = vmatprep.subr.bf16.mxu0 0
  %1126 = vmatpush1.bf16.msra.mxu0 0
  %1127 = vmatprep.subr.bf16.mxu0 0
  %1128 = vmatpush1.bf16.msra.mxu0 0
  %1129 = vmatprep.subr.bf16.mxu0 0
  %1130 = vmatpush1.bf16.msra.mxu0 0
  %1131 = vmatprep.subr.bf16.mxu0 0
  %1132 = vmatpush1.bf16.msra.mxu0 0
  %1133 = vmatprep.subr.bf16.mxu0 0
  %1134 = vmatpush1.bf16.msra.mxu0 0
  %1135 = vmatprep.subr.bf16.mxu0 0
  %1136 = vmatpush1.bf16.msra.mxu0 0
  %1137 = vmatprep.subr.bf16.mxu0 0
  %1138 = vmatpush1.bf16.msra.mxu0 0
  %1139 = vmatprep.subr.bf16.mxu0 0
  %1140 = vmatpush1.bf16.msra.mxu0 0
  %1141 = vmatprep.subr.bf16.mxu0 0
  %1142 = vmatpush1.bf16.msra.mxu0 0
  %1143 = vmatprep.subr.bf16.mxu0 0
  %1144 = vmatpush1.bf16.msra.mxu0 0
  %1145 = vmatprep.subr.bf16.mxu0 0
  %1146 = vmatpush1.bf16.msra.mxu0 0
  %1147 = vmatprep.subr.bf16.mxu0 0
  %1148 = vmatpush1.bf16.msra.mxu0 0
  %1149 = vmatprep.subr.bf16.mxu0 0
  %1150 = vmatpush1.bf16.msra.mxu0 0
  %1151 = vmatprep.mubr.bf16.mxu0 0
  %1152 = vmatmul.mubr.bf16.gmra.mrb[0].mxu0 %v1052
  %v1153 = vpop.f32.mrb[0].mxu0
  %v1154 = vadd.f32 0.0, %v1153
  %v1155 = vpop.f32.mrb[0].mxu0
  %v1156 = vadd.f32 0.0, %v1155
  %v1157 = vpop.f32.mrb[0].mxu0
  %v1158 = vpop.f32.mrb[0].mxu0
  %1159 = vdwg.mxu0
  %1160 = vmatprep.subr.bf16.mxu0 %v1070
  %1161 = vmatpush1.bf16.msra.mxu0 %v1067
  %1162 = vmatprep.subr.bf16.mxu0 0
  %1163 = vmatpush1.bf16.msra.mxu0 0
  %1164 = vmatprep.subr.bf16.mxu0 0
  %1165 = vmatpush1.bf16.msra.mxu0 0
  %1166 = vmatprep.subr.bf16.mxu0 0
  %1167 = vmatpush1.bf16.msra.mxu0 0
  %1168 = vmatprep.subr.bf16.mxu0 0
  %1169 = vmatpush1.bf16.msra.mxu0 0
  %1170 = vmatprep.subr.bf16.mxu0 0
  %1171 = vmatpush1.bf16.msra.mxu0 0
  %1172 = vmatprep.subr.bf16.mxu0 0
  %1173 = vmatpush1.bf16.msra.mxu0 0
  %1174 = vmatprep.subr.bf16.mxu0 0
  %1175 = vmatpush1.bf16.msra.mxu0 0
  %1176 = vmatprep.subr.bf16.mxu0 0
  %1177 = vmatpush1.bf16.msra.mxu0 0
  %1178 = vmatprep.subr.bf16.mxu0 0
  %1179 = vmatpush1.bf16.msra.mxu0 0
  %1180 = vmatprep.subr.bf16.mxu0 0
  %1181 = vmatpush1.bf16.msra.mxu0 0
  %1182 = vmatprep.subr.bf16.mxu0 0
  %1183 = vmatpush1.bf16.msra.mxu0 0
  %1184 = vmatprep.subr.bf16.mxu0 0
  %1185 = vmatpush1.bf16.msra.mxu0 0
  %1186 = vmatprep.subr.bf16.mxu0 0
  %1187 = vmatpush1.bf16.msra.mxu0 0
  %1188 = vmatprep.subr.bf16.mxu0 0
  %1189 = vmatpush1.bf16.msra.mxu0 0
  %1190 = vmatprep.subr.bf16.mxu0 0
  %1191 = vmatpush1.bf16.msra.mxu0 0
  %1192 = vmatprep.mubr.bf16.mxu0 0
  %1193 = vmatmul.mubr.bf16.gmra.mrb[0].mxu0 %v1052
  %v1194 = vpop.f32.mrb[0].mxu0
  %v1195 = vadd.f32 0.0, %v1194
  %v1196 = vpop.f32.mrb[0].mxu0
  %v1197 = vadd.f32 0.0, %v1196
  %v1198 = vpop.f32.mrb[0].mxu0
  %v1199 = vpop.f32.mrb[0].mxu0
  %1200 = vdwg.mxu0
  %1201 = vmatprep.subr.bf16.mxu0 %v1076
  %1202 = vmatpush1.bf16.msra.mxu0 %v1073
  %1203 = vmatprep.subr.bf16.mxu0 0
  %1204 = vmatpush1.bf16.msra.mxu0 0
  %1205 = vmatprep.subr.bf16.mxu0 0
  %1206 = vmatpush1.bf16.msra.mxu0 0
  %1207 = vmatprep.subr.bf16.mxu0 0
  %1208 = vmatpush1.bf16.msra.mxu0 0
  %1209 = vmatprep.subr.bf16.mxu0 0
  %1210 = vmatpush1.bf16.msra.mxu0 0
  %1211 = vmatprep.subr.bf16.mxu0 0
  %1212 = vmatpush1.bf16.msra.mxu0 0
  %1213 = vmatprep.subr.bf16.mxu0 0
  %1214 = vmatpush1.bf16.msra.mxu0 0
  %1215 = vmatprep.subr.bf16.mxu0 0
  %1216 = vmatpush1.bf16.msra.mxu0 0
  %1217 = vmatprep.subr.bf16.mxu0 0
  %1218 = vmatpush1.bf16.msra.mxu0 0
  %1219 = vmatprep.subr.bf16.mxu0 0
  %1220 = vmatpush1.bf16.msra.mxu0 0
  %1221 = vmatprep.subr.bf16.mxu0 0
  %1222 = vmatpush1.bf16.msra.mxu0 0
  %1223 = vmatprep.subr.bf16.mxu0 0
  %1224 = vmatpush1.bf16.msra.mxu0 0
  %1225 = vmatprep.subr.bf16.mxu0 0
  %1226 = vmatpush1.bf16.msra.mxu0 0
  %1227 = vmatprep.subr.bf16.mxu0 0
  %1228 = vmatpush1.bf16.msra.mxu0 0
  %1229 = vmatprep.subr.bf16.mxu0 0
  %1230 = vmatpush1.bf16.msra.mxu0 0
  %1231 = vmatprep.subr.bf16.mxu0 0
  %1232 = vmatpush1.bf16.msra.mxu0 0
  %1233 = vmatprep.mubr.bf16.mxu0 0
  %1234 = vmatmul.mubr.bf16.gmra.mrb[0].mxu0 %v1052
  %v1235 = vpop.f32.mrb[0].mxu0
  %v1236 = vadd.f32 0.0, %v1235
  %v1237 = vpop.f32.mrb[0].mxu0
  %v1238 = vadd.f32 0.0, %v1237
  %v1239 = vpop.f32.mrb[0].mxu0
  %v1240 = vpop.f32.mrb[0].mxu0
  %1241 = vdwg.mxu0
  %v1242 = vadd.f32 %v1016, %v1113
  %v1243 = vadd.f32 %v1017, %v1115
  %v1244 = vadd.f32 %v1018, %v1154
  %v1245 = vadd.f32 %v1019, %v1156
  %v1246 = vadd.f32 %v1020, %v1195
  %v1247 = vadd.f32 %v1021, %v1197
  %v1248 = vadd.f32 %v1022, %v1236
  %v1249 = vadd.f32 %v1023, %v1238
  %1250 = vrot.lane.b32.xlu0 %v125, 99
  %v1251 = vpop.permute.xlu0 %1250
  %1252 = vrot.lane.b32.xlu0 %v126, 99
  %v1253 = vpop.permute.xlu0 %1252
  %1254 = vrot.lane.b32.xlu0 %v127, 99
  %v1255 = vpop.permute.xlu0 %1254
  %1256 = vrot.lane.b32.xlu0 %v128, 99
  %v1257 = vpop.permute.xlu0 %1256
  %1258 = vrot.lane.b32.xlu0 %v129, 99
  %v1259 = vpop.permute.xlu0 %1258
  %1260 = vrot.lane.b32.xlu0 %v130, 99
  %v1261 = vpop.permute.xlu0 %1260
  %1262 = vrot.lane.b32.xlu0 %v131, 99
  %v1263 = vpop.permute.xlu0 %1262
  %1264 = vrot.lane.b32.xlu0 %v132, 99
  %v1265 = vpop.permute.xlu0 %1264
  %1266 = vrot.lane.b32.xlu0 %v133, 99
  %v1267 = vpop.permute.xlu0 %1266
  %vm1268 = vcmask 809984
  %v1269 = vsel %vm1268, %v1251, %v1253
  %v1270 = vsel %vm1268, %v1253, %v1255
  %v1271 = vsel %vm1268, %v1255, %v1257
  %v1272 = vsel %vm1268, %v1257, %v1259
  %v1273 = vsel %vm1268, %v1259, %v1261
  %v1274 = vsel %vm1268, %v1261, %v1263
  %v1275 = vsel %vm1268, %v1263, %v1265
  %v1276 = vsel %vm1268, %v1265, %v1267
  %v1278 = vsel %vm161, %v84, 0
  %v1281 = vsel %vm165, %v1269, 0
  %v1284 = vsel %vm165, %v1270, 0
  %v1287 = vsel %vm165, %v1271, 0
  %v1290 = vsel %vm165, %v1272, 0
  %v1293 = vsel %vm165, %v1273, 0
  %v1296 = vsel %vm165, %v1274, 0
  %v1299 = vsel %vm165, %v1275, 0
  %v1302 = vsel %vm165, %v1276, 0
  %1304 = vmatprep.subr.bf16.mxu0 %v1284
  %1305 = vmatpush1.bf16.msra.mxu0 %v1281
  %1306 = vmatprep.subr.bf16.mxu0 0
  %1307 = vmatpush1.bf16.msra.mxu0 0
  %1308 = vmatprep.subr.bf16.mxu0 0
  %1309 = vmatpush1.bf16.msra.mxu0 0
  %1310 = vmatprep.subr.bf16.mxu0 0
  %1311 = vmatpush1.bf16.msra.mxu0 0
  %1312 = vmatprep.subr.bf16.mxu0 0
  %1313 = vmatpush1.bf16.msra.mxu0 0
  %1314 = vmatprep.subr.bf16.mxu0 0
  %1315 = vmatpush1.bf16.msra.mxu0 0
  %1316 = vmatprep.subr.bf16.mxu0 0
  %1317 = vmatpush1.bf16.msra.mxu0 0
  %1318 = vmatprep.subr.bf16.mxu0 0
  %1319 = vmatpush1.bf16.msra.mxu0 0
  %1320 = vmatprep.subr.bf16.mxu0 0
  %1321 = vmatpush1.bf16.msra.mxu0 0
  %1322 = vmatprep.subr.bf16.mxu0 0
  %1323 = vmatpush1.bf16.msra.mxu0 0
  %1324 = vmatprep.subr.bf16.mxu0 0
  %1325 = vmatpush1.bf16.msra.mxu0 0
  %1326 = vmatprep.subr.bf16.mxu0 0
  %1327 = vmatpush1.bf16.msra.mxu0 0
  %1328 = vmatprep.subr.bf16.mxu0 0
  %1329 = vmatpush1.bf16.msra.mxu0 0
  %1330 = vmatprep.subr.bf16.mxu0 0
  %1331 = vmatpush1.bf16.msra.mxu0 0
  %1332 = vmatprep.subr.bf16.mxu0 0
  %1333 = vmatpush1.bf16.msra.mxu0 0
  %1334 = vmatprep.subr.bf16.mxu0 0
  %1335 = vmatpush1.bf16.msra.mxu0 0
  %1336 = vmatprep.mubr.bf16.mxu0 0
  %1337 = vmatmul.mubr.bf16.gmra.mrb[0].mxu0 %v1278
  %v1338 = vpop.f32.mrb[0].mxu0
  %v1339 = vadd.f32 0.0, %v1338
  %v1340 = vpop.f32.mrb[0].mxu0
  %v1341 = vadd.f32 0.0, %v1340
  %v1342 = vpop.f32.mrb[0].mxu0
  %v1343 = vpop.f32.mrb[0].mxu0
  %1344 = vdwg.mxu0
  %1345 = vmatprep.subr.bf16.mxu0 %v1290
  %1346 = vmatpush1.bf16.msra.mxu0 %v1287
  %1347 = vmatprep.subr.bf16.mxu0 0
  %1348 = vmatpush1.bf16.msra.mxu0 0
  %1349 = vmatprep.subr.bf16.mxu0 0
  %1350 = vmatpush1.bf16.msra.mxu0 0
  %1351 = vmatprep.subr.bf16.mxu0 0
  %1352 = vmatpush1.bf16.msra.mxu0 0
  %1353 = vmatprep.subr.bf16.mxu0 0
  %1354 = vmatpush1.bf16.msra.mxu0 0
  %1355 = vmatprep.subr.bf16.mxu0 0
  %1356 = vmatpush1.bf16.msra.mxu0 0
  %1357 = vmatprep.subr.bf16.mxu0 0
  %1358 = vmatpush1.bf16.msra.mxu0 0
  %1359 = vmatprep.subr.bf16.mxu0 0
  %1360 = vmatpush1.bf16.msra.mxu0 0
  %1361 = vmatprep.subr.bf16.mxu0 0
  %1362 = vmatpush1.bf16.msra.mxu0 0
  %1363 = vmatprep.subr.bf16.mxu0 0
  %1364 = vmatpush1.bf16.msra.mxu0 0
  %1365 = vmatprep.subr.bf16.mxu0 0
  %1366 = vmatpush1.bf16.msra.mxu0 0
  %1367 = vmatprep.subr.bf16.mxu0 0
  %1368 = vmatpush1.bf16.msra.mxu0 0
  %1369 = vmatprep.subr.bf16.mxu0 0
  %1370 = vmatpush1.bf16.msra.mxu0 0
  %1371 = vmatprep.subr.bf16.mxu0 0
  %1372 = vmatpush1.bf16.msra.mxu0 0
  %1373 = vmatprep.subr.bf16.mxu0 0
  %1374 = vmatpush1.bf16.msra.mxu0 0
  %1375 = vmatprep.subr.bf16.mxu0 0
  %1376 = vmatpush1.bf16.msra.mxu0 0
  %1377 = vmatprep.mubr.bf16.mxu0 0
  %1378 = vmatmul.mubr.bf16.gmra.mrb[0].mxu0 %v1278
  %v1379 = vpop.f32.mrb[0].mxu0
  %v1380 = vadd.f32 0.0, %v1379
  %v1381 = vpop.f32.mrb[0].mxu0
  %v1382 = vadd.f32 0.0, %v1381
  %v1383 = vpop.f32.mrb[0].mxu0
  %v1384 = vpop.f32.mrb[0].mxu0
  %1385 = vdwg.mxu0
  %1386 = vmatprep.subr.bf16.mxu0 %v1296
  %1387 = vmatpush1.bf16.msra.mxu0 %v1293
  %1388 = vmatprep.subr.bf16.mxu0 0
  %1389 = vmatpush1.bf16.msra.mxu0 0
  %1390 = vmatprep.subr.bf16.mxu0 0
  %1391 = vmatpush1.bf16.msra.mxu0 0
  %1392 = vmatprep.subr.bf16.mxu0 0
  %1393 = vmatpush1.bf16.msra.mxu0 0
  %1394 = vmatprep.subr.bf16.mxu0 0
  %1395 = vmatpush1.bf16.msra.mxu0 0
  %1396 = vmatprep.subr.bf16.mxu0 0
  %1397 = vmatpush1.bf16.msra.mxu0 0
  %1398 = vmatprep.subr.bf16.mxu0 0
  %1399 = vmatpush1.bf16.msra.mxu0 0
  %1400 = vmatprep.subr.bf16.mxu0 0
  %1401 = vmatpush1.bf16.msra.mxu0 0
  %1402 = vmatprep.subr.bf16.mxu0 0
  %1403 = vmatpush1.bf16.msra.mxu0 0
  %1404 = vmatprep.subr.bf16.mxu0 0
  %1405 = vmatpush1.bf16.msra.mxu0 0
  %1406 = vmatprep.subr.bf16.mxu0 0
  %1407 = vmatpush1.bf16.msra.mxu0 0
  %1408 = vmatprep.subr.bf16.mxu0 0
  %1409 = vmatpush1.bf16.msra.mxu0 0
  %1410 = vmatprep.subr.bf16.mxu0 0
  %1411 = vmatpush1.bf16.msra.mxu0 0
  %1412 = vmatprep.subr.bf16.mxu0 0
  %1413 = vmatpush1.bf16.msra.mxu0 0
  %1414 = vmatprep.subr.bf16.mxu0 0
  %1415 = vmatpush1.bf16.msra.mxu0 0
  %1416 = vmatprep.subr.bf16.mxu0 0
  %1417 = vmatpush1.bf16.msra.mxu0 0
  %1418 = vmatprep.mubr.bf16.mxu0 0
  %1419 = vmatmul.mubr.bf16.gmra.mrb[0].mxu0 %v1278
  %v1420 = vpop.f32.mrb[0].mxu0
  %v1421 = vadd.f32 0.0, %v1420
  %v1422 = vpop.f32.mrb[0].mxu0
  %v1423 = vadd.f32 0.0, %v1422
  %v1424 = vpop.f32.mrb[0].mxu0
  %v1425 = vpop.f32.mrb[0].mxu0
  %1426 = vdwg.mxu0
  %1427 = vmatprep.subr.bf16.mxu0 %v1302
  %1428 = vmatpush1.bf16.msra.mxu0 %v1299
  %1429 = vmatprep.subr.bf16.mxu0 0
  %1430 = vmatpush1.bf16.msra.mxu0 0
  %1431 = vmatprep.subr.bf16.mxu0 0
  %1432 = vmatpush1.bf16.msra.mxu0 0
  %1433 = vmatprep.subr.bf16.mxu0 0
  %1434 = vmatpush1.bf16.msra.mxu0 0
  %1435 = vmatprep.subr.bf16.mxu0 0
  %1436 = vmatpush1.bf16.msra.mxu0 0
  %1437 = vmatprep.subr.bf16.mxu0 0
  %1438 = vmatpush1.bf16.msra.mxu0 0
  %1439 = vmatprep.subr.bf16.mxu0 0
  %1440 = vmatpush1.bf16.msra.mxu0 0
  %1441 = vmatprep.subr.bf16.mxu0 0
  %1442 = vmatpush1.bf16.msra.mxu0 0
  %1443 = vmatprep.subr.bf16.mxu0 0
  %1444 = vmatpush1.bf16.msra.mxu0 0
  %1445 = vmatprep.subr.bf16.mxu0 0
  %1446 = vmatpush1.bf16.msra.mxu0 0
  %1447 = vmatprep.subr.bf16.mxu0 0
  %1448 = vmatpush1.bf16.msra.mxu0 0
  %1449 = vmatprep.subr.bf16.mxu0 0
  %1450 = vmatpush1.bf16.msra.mxu0 0
  %1451 = vmatprep.subr.bf16.mxu0 0
  %1452 = vmatpush1.bf16.msra.mxu0 0
  %1453 = vmatprep.subr.bf16.mxu0 0
  %1454 = vmatpush1.bf16.msra.mxu0 0
  %1455 = vmatprep.subr.bf16.mxu0 0
  %1456 = vmatpush1.bf16.msra.mxu0 0
  %1457 = vmatprep.subr.bf16.mxu0 0
  %1458 = vmatpush1.bf16.msra.mxu0 0
  %1459 = vmatprep.mubr.bf16.mxu0 0
  %1460 = vmatmul.mubr.bf16.gmra.mrb[0].mxu0 %v1278
  %v1461 = vpop.f32.mrb[0].mxu0
  %v1462 = vadd.f32 0.0, %v1461
  %v1463 = vpop.f32.mrb[0].mxu0
  %v1464 = vadd.f32 0.0, %v1463
  %v1465 = vpop.f32.mrb[0].mxu0
  %v1466 = vpop.f32.mrb[0].mxu0
  %1467 = vdwg.mxu0
  %v1468 = vadd.f32 %v1242, %v1339
  %v1469 = vadd.f32 %v1243, %v1341
  %v1470 = vadd.f32 %v1244, %v1380
  %v1471 = vadd.f32 %v1245, %v1382
  %v1472 = vadd.f32 %v1246, %v1421
  %v1473 = vadd.f32 %v1247, %v1423
  %v1474 = vadd.f32 %v1248, %v1462
  %v1475 = vadd.f32 %v1249, %v1464
  %1476 = vrot.lane.b32.xlu0 %v125, 91
  %v1477 = vpop.permute.xlu0 %1476
  %1478 = vrot.lane.b32.xlu0 %v126, 91
  %v1479 = vpop.permute.xlu0 %1478
  %1480 = vrot.lane.b32.xlu0 %v127, 91
  %v1481 = vpop.permute.xlu0 %1480
  %1482 = vrot.lane.b32.xlu0 %v128, 91
  %v1483 = vpop.permute.xlu0 %1482
  %1484 = vrot.lane.b32.xlu0 %v129, 91
  %v1485 = vpop.permute.xlu0 %1484
  %1486 = vrot.lane.b32.xlu0 %v130, 91
  %v1487 = vpop.permute.xlu0 %1486
  %1488 = vrot.lane.b32.xlu0 %v131, 91
  %v1489 = vpop.permute.xlu0 %1488
  %1490 = vrot.lane.b32.xlu0 %v132, 91
  %v1491 = vpop.permute.xlu0 %1490
  %1492 = vrot.lane.b32.xlu0 %v133, 91
  %v1493 = vpop.permute.xlu0 %1492
  %vm1494 = vcmask 744448
  %v1495 = vsel %vm1494, %v1477, %v1479
  %v1496 = vsel %vm1494, %v1479, %v1481
  %v1497 = vsel %vm1494, %v1481, %v1483
  %v1498 = vsel %vm1494, %v1483, %v1485
  %v1499 = vsel %vm1494, %v1485, %v1487
  %v1500 = vsel %vm1494, %v1487, %v1489
  %v1501 = vsel %vm1494, %v1489, %v1491
  %v1502 = vsel %vm1494, %v1491, %v1493
  %v1504 = vsel %vm161, %v85, 0
  %v1507 = vsel %vm165, %v1495, 0
  %v1510 = vsel %vm165, %v1496, 0
  %v1513 = vsel %vm165, %v1497, 0
  %v1516 = vsel %vm165, %v1498, 0
  %v1519 = vsel %vm165, %v1499, 0
  %v1522 = vsel %vm165, %v1500, 0
  %v1525 = vsel %vm165, %v1501, 0
  %v1528 = vsel %vm165, %v1502, 0
  %1530 = vmatprep.subr.bf16.mxu0 %v1510
  %1531 = vmatpush1.bf16.msra.mxu0 %v1507
  %1532 = vmatprep.subr.bf16.mxu0 0
  %1533 = vmatpush1.bf16.msra.mxu0 0
  %1534 = vmatprep.subr.bf16.mxu0 0
  %1535 = vmatpush1.bf16.msra.mxu0 0
  %1536 = vmatprep.subr.bf16.mxu0 0
  %1537 = vmatpush1.bf16.msra.mxu0 0
  %1538 = vmatprep.subr.bf16.mxu0 0
  %1539 = vmatpush1.bf16.msra.mxu0 0
  %1540 = vmatprep.subr.bf16.mxu0 0
  %1541 = vmatpush1.bf16.msra.mxu0 0
  %1542 = vmatprep.subr.bf16.mxu0 0
  %1543 = vmatpush1.bf16.msra.mxu0 0
  %1544 = vmatprep.subr.bf16.mxu0 0
  %1545 = vmatpush1.bf16.msra.mxu0 0
  %1546 = vmatprep.subr.bf16.mxu0 0
  %1547 = vmatpush1.bf16.msra.mxu0 0
  %1548 = vmatprep.subr.bf16.mxu0 0
  %1549 = vmatpush1.bf16.msra.mxu0 0
  %1550 = vmatprep.subr.bf16.mxu0 0
  %1551 = vmatpush1.bf16.msra.mxu0 0
  %1552 = vmatprep.subr.bf16.mxu0 0
  %1553 = vmatpush1.bf16.msra.mxu0 0
  %1554 = vmatprep.subr.bf16.mxu0 0
  %1555 = vmatpush1.bf16.msra.mxu0 0
  %1556 = vmatprep.subr.bf16.mxu0 0
  %1557 = vmatpush1.bf16.msra.mxu0 0
  %1558 = vmatprep.subr.bf16.mxu0 0
  %1559 = vmatpush1.bf16.msra.mxu0 0
  %1560 = vmatprep.subr.bf16.mxu0 0
  %1561 = vmatpush1.bf16.msra.mxu0 0
  %1562 = vmatprep.mubr.bf16.mxu0 0
  %1563 = vmatmul.mubr.bf16.gmra.mrb[0].mxu0 %v1504
  %v1564 = vpop.f32.mrb[0].mxu0
  %v1565 = vadd.f32 0.0, %v1564
  %v1566 = vpop.f32.mrb[0].mxu0
  %v1567 = vadd.f32 0.0, %v1566
  %v1568 = vpop.f32.mrb[0].mxu0
  %v1569 = vpop.f32.mrb[0].mxu0
  %1570 = vdwg.mxu0
  %1571 = vmatprep.subr.bf16.mxu0 %v1516
  %1572 = vmatpush1.bf16.msra.mxu0 %v1513
  %1573 = vmatprep.subr.bf16.mxu0 0
  %1574 = vmatpush1.bf16.msra.mxu0 0
  %1575 = vmatprep.subr.bf16.mxu0 0
  %1576 = vmatpush1.bf16.msra.mxu0 0
  %1577 = vmatprep.subr.bf16.mxu0 0
  %1578 = vmatpush1.bf16.msra.mxu0 0
  %1579 = vmatprep.subr.bf16.mxu0 0
  %1580 = vmatpush1.bf16.msra.mxu0 0
  %1581 = vmatprep.subr.bf16.mxu0 0
  %1582 = vmatpush1.bf16.msra.mxu0 0
  %1583 = vmatprep.subr.bf16.mxu0 0
  %1584 = vmatpush1.bf16.msra.mxu0 0
  %1585 = vmatprep.subr.bf16.mxu0 0
  %1586 = vmatpush1.bf16.msra.mxu0 0
  %1587 = vmatprep.subr.bf16.mxu0 0
  %1588 = vmatpush1.bf16.msra.mxu0 0
  %1589 = vmatprep.subr.bf16.mxu0 0
  %1590 = vmatpush1.bf16.msra.mxu0 0
  %1591 = vmatprep.subr.bf16.mxu0 0
  %1592 = vmatpush1.bf16.msra.mxu0 0
  %1593 = vmatprep.subr.bf16.mxu0 0
  %1594 = vmatpush1.bf16.msra.mxu0 0
  %1595 = vmatprep.subr.bf16.mxu0 0
  %1596 = vmatpush1.bf16.msra.mxu0 0
  %1597 = vmatprep.subr.bf16.mxu0 0
  %1598 = vmatpush1.bf16.msra.mxu0 0
  %1599 = vmatprep.subr.bf16.mxu0 0
  %1600 = vmatpush1.bf16.msra.mxu0 0
  %1601 = vmatprep.subr.bf16.mxu0 0
  %1602 = vmatpush1.bf16.msra.mxu0 0
  %1603 = vmatprep.mubr.bf16.mxu0 0
  %1604 = vmatmul.mubr.bf16.gmra.mrb[0].mxu0 %v1504
  %v1605 = vpop.f32.mrb[0].mxu0
  %v1606 = vadd.f32 0.0, %v1605
  %v1607 = vpop.f32.mrb[0].mxu0
  %v1608 = vadd.f32 0.0, %v1607
  %v1609 = vpop.f32.mrb[0].mxu0
  %v1610 = vpop.f32.mrb[0].mxu0
  %1611 = vdwg.mxu0
  %1612 = vmatprep.subr.bf16.mxu0 %v1522
  %1613 = vmatpush1.bf16.msra.mxu0 %v1519
  %1614 = vmatprep.subr.bf16.mxu0 0
  %1615 = vmatpush1.bf16.msra.mxu0 0
  %1616 = vmatprep.subr.bf16.mxu0 0
  %1617 = vmatpush1.bf16.msra.mxu0 0
  %1618 = vmatprep.subr.bf16.mxu0 0
  %1619 = vmatpush1.bf16.msra.mxu0 0
  %1620 = vmatprep.subr.bf16.mxu0 0
  %1621 = vmatpush1.bf16.msra.mxu0 0
  %1622 = vmatprep.subr.bf16.mxu0 0
  %1623 = vmatpush1.bf16.msra.mxu0 0
  %1624 = vmatprep.subr.bf16.mxu0 0
  %1625 = vmatpush1.bf16.msra.mxu0 0
  %1626 = vmatprep.subr.bf16.mxu0 0
  %1627 = vmatpush1.bf16.msra.mxu0 0
  %1628 = vmatprep.subr.bf16.mxu0 0
  %1629 = vmatpush1.bf16.msra.mxu0 0
  %1630 = vmatprep.subr.bf16.mxu0 0
  %1631 = vmatpush1.bf16.msra.mxu0 0
  %1632 = vmatprep.subr.bf16.mxu0 0
  %1633 = vmatpush1.bf16.msra.mxu0 0
  %1634 = vmatprep.subr.bf16.mxu0 0
  %1635 = vmatpush1.bf16.msra.mxu0 0
  %1636 = vmatprep.subr.bf16.mxu0 0
  %1637 = vmatpush1.bf16.msra.mxu0 0
  %1638 = vmatprep.subr.bf16.mxu0 0
  %1639 = vmatpush1.bf16.msra.mxu0 0
  %1640 = vmatprep.subr.bf16.mxu0 0
  %1641 = vmatpush1.bf16.msra.mxu0 0
  %1642 = vmatprep.subr.bf16.mxu0 0
  %1643 = vmatpush1.bf16.msra.mxu0 0
  %1644 = vmatprep.mubr.bf16.mxu0 0
  %1645 = vmatmul.mubr.bf16.gmra.mrb[0].mxu0 %v1504
  %v1646 = vpop.f32.mrb[0].mxu0
  %v1647 = vadd.f32 0.0, %v1646
  %v1648 = vpop.f32.mrb[0].mxu0
  %v1649 = vadd.f32 0.0, %v1648
  %v1650 = vpop.f32.mrb[0].mxu0
  %v1651 = vpop.f32.mrb[0].mxu0
  %1652 = vdwg.mxu0
  %1653 = vmatprep.subr.bf16.mxu0 %v1528
  %1654 = vmatpush1.bf16.msra.mxu0 %v1525
  %1655 = vmatprep.subr.bf16.mxu0 0
  %1656 = vmatpush1.bf16.msra.mxu0 0
  %1657 = vmatprep.subr.bf16.mxu0 0
  %1658 = vmatpush1.bf16.msra.mxu0 0
  %1659 = vmatprep.subr.bf16.mxu0 0
  %1660 = vmatpush1.bf16.msra.mxu0 0
  %1661 = vmatprep.subr.bf16.mxu0 0
  %1662 = vmatpush1.bf16.msra.mxu0 0
  %1663 = vmatprep.subr.bf16.mxu0 0
  %1664 = vmatpush1.bf16.msra.mxu0 0
  %1665 = vmatprep.subr.bf16.mxu0 0
  %1666 = vmatpush1.bf16.msra.mxu0 0
  %1667 = vmatprep.subr.bf16.mxu0 0
  %1668 = vmatpush1.bf16.msra.mxu0 0
  %1669 = vmatprep.subr.bf16.mxu0 0
  %1670 = vmatpush1.bf16.msra.mxu0 0
  %1671 = vmatprep.subr.bf16.mxu0 0
  %1672 = vmatpush1.bf16.msra.mxu0 0
  %1673 = vmatprep.subr.bf16.mxu0 0
  %1674 = vmatpush1.bf16.msra.mxu0 0
  %1675 = vmatprep.subr.bf16.mxu0 0
  %1676 = vmatpush1.bf16.msra.mxu0 0
  %1677 = vmatprep.subr.bf16.mxu0 0
  %1678 = vmatpush1.bf16.msra.mxu0 0
  %1679 = vmatprep.subr.bf16.mxu0 0
  %1680 = vmatpush1.bf16.msra.mxu0 0
  %1681 = vmatprep.subr.bf16.mxu0 0
  %1682 = vmatpush1.bf16.msra.mxu0 0
  %1683 = vmatprep.subr.bf16.mxu0 0
  %1684 = vmatpush1.bf16.msra.mxu0 0
  %1685 = vmatprep.mubr.bf16.mxu0 0
  %1686 = vmatmul.mubr.bf16.gmra.mrb[0].mxu0 %v1504
  %v1687 = vpop.f32.mrb[0].mxu0
  %v1688 = vadd.f32 0.0, %v1687
  %v1689 = vpop.f32.mrb[0].mxu0
  %v1690 = vadd.f32 0.0, %v1689
  %v1691 = vpop.f32.mrb[0].mxu0
  %v1692 = vpop.f32.mrb[0].mxu0
  %1693 = vdwg.mxu0
  %v1694 = vadd.f32 %v1468, %v1565
  %v1695 = vadd.f32 %v1469, %v1567
  %v1696 = vadd.f32 %v1470, %v1606
  %v1697 = vadd.f32 %v1471, %v1608
  %v1698 = vadd.f32 %v1472, %v1647
  %v1699 = vadd.f32 %v1473, %v1649
  %v1700 = vadd.f32 %v1474, %v1688
  %v1701 = vadd.f32 %v1475, %v1690
  %1702 = vrot.lane.b32.xlu0 %v125, 90
  %v1703 = vpop.permute.xlu0 %1702
  %1704 = vrot.lane.b32.xlu0 %v126, 90
  %v1705 = vpop.permute.xlu0 %1704
  %1706 = vrot.lane.b32.xlu0 %v127, 90
  %v1707 = vpop.permute.xlu0 %1706
  %1708 = vrot.lane.b32.xlu0 %v128, 90
  %v1709 = vpop.permute.xlu0 %1708
  %1710 = vrot.lane.b32.xlu0 %v129, 90
  %v1711 = vpop.permute.xlu0 %1710
  %1712 = vrot.lane.b32.xlu0 %v130, 90
  %v1713 = vpop.permute.xlu0 %1712
  %1714 = vrot.lane.b32.xlu0 %v131, 90
  %v1715 = vpop.permute.xlu0 %1714
  %1716 = vrot.lane.b32.xlu0 %v132, 90
  %v1717 = vpop.permute.xlu0 %1716
  %1718 = vrot.lane.b32.xlu0 %v133, 90
  %v1719 = vpop.permute.xlu0 %1718
  %vm1720 = vcmask 736256
  %v1721 = vsel %vm1720, %v1703, %v1705
  %v1722 = vsel %vm1720, %v1705, %v1707
  %v1723 = vsel %vm1720, %v1707, %v1709
  %v1724 = vsel %vm1720, %v1709, %v1711
  %v1725 = vsel %vm1720, %v1711, %v1713
  %v1726 = vsel %vm1720, %v1713, %v1715
  %v1727 = vsel %vm1720, %v1715, %v1717
  %v1728 = vsel %vm1720, %v1717, %v1719
  %v1730 = vsel %vm161, %v86, 0
  %v1733 = vsel %vm165, %v1721, 0
  %v1736 = vsel %vm165, %v1722, 0
  %v1739 = vsel %vm165, %v1723, 0
  %v1742 = vsel %vm165, %v1724, 0
  %v1745 = vsel %vm165, %v1725, 0
  %v1748 = vsel %vm165, %v1726, 0
  %v1751 = vsel %vm165, %v1727, 0
  %v1754 = vsel %vm165, %v1728, 0
  %1756 = vmatprep.subr.bf16.mxu0 %v1736
  %1757 = vmatpush1.bf16.msra.mxu0 %v1733
  %1758 = vmatprep.subr.bf16.mxu0 0
  %1759 = vmatpush1.bf16.msra.mxu0 0
  %1760 = vmatprep.subr.bf16.mxu0 0
  %1761 = vmatpush1.bf16.msra.mxu0 0
  %1762 = vmatprep.subr.bf16.mxu0 0
  %1763 = vmatpush1.bf16.msra.mxu0 0
  %1764 = vmatprep.subr.bf16.mxu0 0
  %1765 = vmatpush1.bf16.msra.mxu0 0
  %1766 = vmatprep.subr.bf16.mxu0 0
  %1767 = vmatpush1.bf16.msra.mxu0 0
  %1768 = vmatprep.subr.bf16.mxu0 0
  %1769 = vmatpush1.bf16.msra.mxu0 0
  %1770 = vmatprep.subr.bf16.mxu0 0
  %1771 = vmatpush1.bf16.msra.mxu0 0
  %1772 = vmatprep.subr.bf16.mxu0 0
  %1773 = vmatpush1.bf16.msra.mxu0 0
  %1774 = vmatprep.subr.bf16.mxu0 0
  %1775 = vmatpush1.bf16.msra.mxu0 0
  %1776 = vmatprep.subr.bf16.mxu0 0
  %1777 = vmatpush1.bf16.msra.mxu0 0
  %1778 = vmatprep.subr.bf16.mxu0 0
  %1779 = vmatpush1.bf16.msra.mxu0 0
  %1780 = vmatprep.subr.bf16.mxu0 0
  %1781 = vmatpush1.bf16.msra.mxu0 0
  %1782 = vmatprep.subr.bf16.mxu0 0
  %1783 = vmatpush1.bf16.msra.mxu0 0
  %1784 = vmatprep.subr.bf16.mxu0 0
  %1785 = vmatpush1.bf16.msra.mxu0 0
  %1786 = vmatprep.subr.bf16.mxu0 0
  %1787 = vmatpush1.bf16.msra.mxu0 0
  %1788 = vmatprep.mubr.bf16.mxu0 0
  %1789 = vmatmul.mubr.bf16.gmra.mrb[0].mxu0 %v1730
  %v1790 = vpop.f32.mrb[0].mxu0
  %v1791 = vadd.f32 0.0, %v1790
  %v1792 = vpop.f32.mrb[0].mxu0
  %v1793 = vadd.f32 0.0, %v1792
  %v1794 = vpop.f32.mrb[0].mxu0
  %v1795 = vpop.f32.mrb[0].mxu0
  %1796 = vdwg.mxu0
  %1797 = vmatprep.subr.bf16.mxu0 %v1742
  %1798 = vmatpush1.bf16.msra.mxu0 %v1739
  %1799 = vmatprep.subr.bf16.mxu0 0
  %1800 = vmatpush1.bf16.msra.mxu0 0
  %1801 = vmatprep.subr.bf16.mxu0 0
  %1802 = vmatpush1.bf16.msra.mxu0 0
  %1803 = vmatprep.subr.bf16.mxu0 0
  %1804 = vmatpush1.bf16.msra.mxu0 0
  %1805 = vmatprep.subr.bf16.mxu0 0
  %1806 = vmatpush1.bf16.msra.mxu0 0
  %1807 = vmatprep.subr.bf16.mxu0 0
  %1808 = vmatpush1.bf16.msra.mxu0 0
  %1809 = vmatprep.subr.bf16.mxu0 0
  %1810 = vmatpush1.bf16.msra.mxu0 0
  %1811 = vmatprep.subr.bf16.mxu0 0
  %1812 = vmatpush1.bf16.msra.mxu0 0
  %1813 = vmatprep.subr.bf16.mxu0 0
  %1814 = vmatpush1.bf16.msra.mxu0 0
  %1815 = vmatprep.subr.bf16.mxu0 0
  %1816 = vmatpush1.bf16.msra.mxu0 0
  %1817 = vmatprep.subr.bf16.mxu0 0
  %1818 = vmatpush1.bf16.msra.mxu0 0
  %1819 = vmatprep.subr.bf16.mxu0 0
  %1820 = vmatpush1.bf16.msra.mxu0 0
  %1821 = vmatprep.subr.bf16.mxu0 0
  %1822 = vmatpush1.bf16.msra.mxu0 0
  %1823 = vmatprep.subr.bf16.mxu0 0
  %1824 = vmatpush1.bf16.msra.mxu0 0
  %1825 = vmatprep.subr.bf16.mxu0 0
  %1826 = vmatpush1.bf16.msra.mxu0 0
  %1827 = vmatprep.subr.bf16.mxu0 0
  %1828 = vmatpush1.bf16.msra.mxu0 0
  %1829 = vmatprep.mubr.bf16.mxu0 0
  %1830 = vmatmul.mubr.bf16.gmra.mrb[0].mxu0 %v1730
  %v1831 = vpop.f32.mrb[0].mxu0
  %v1832 = vadd.f32 0.0, %v1831
  %v1833 = vpop.f32.mrb[0].mxu0
  %v1834 = vadd.f32 0.0, %v1833
  %v1835 = vpop.f32.mrb[0].mxu0
  %v1836 = vpop.f32.mrb[0].mxu0
  %1837 = vdwg.mxu0
  %1838 = vmatprep.subr.bf16.mxu0 %v1748
  %1839 = vmatpush1.bf16.msra.mxu0 %v1745
  %1840 = vmatprep.subr.bf16.mxu0 0
  %1841 = vmatpush1.bf16.msra.mxu0 0
  %1842 = vmatprep.subr.bf16.mxu0 0
  %1843 = vmatpush1.bf16.msra.mxu0 0
  %1844 = vmatprep.subr.bf16.mxu0 0
  %1845 = vmatpush1.bf16.msra.mxu0 0
  %1846 = vmatprep.subr.bf16.mxu0 0
  %1847 = vmatpush1.bf16.msra.mxu0 0
  %1848 = vmatprep.subr.bf16.mxu0 0
  %1849 = vmatpush1.bf16.msra.mxu0 0
  %1850 = vmatprep.subr.bf16.mxu0 0
  %1851 = vmatpush1.bf16.msra.mxu0 0
  %1852 = vmatprep.subr.bf16.mxu0 0
  %1853 = vmatpush1.bf16.msra.mxu0 0
  %1854 = vmatprep.subr.bf16.mxu0 0
  %1855 = vmatpush1.bf16.msra.mxu0 0
  %1856 = vmatprep.subr.bf16.mxu0 0
  %1857 = vmatpush1.bf16.msra.mxu0 0
  %1858 = vmatprep.subr.bf16.mxu0 0
  %1859 = vmatpush1.bf16.msra.mxu0 0
  %1860 = vmatprep.subr.bf16.mxu0 0
  %1861 = vmatpush1.bf16.msra.mxu0 0
  %1862 = vmatprep.subr.bf16.mxu0 0
  %1863 = vmatpush1.bf16.msra.mxu0 0
  %1864 = vmatprep.subr.bf16.mxu0 0
  %1865 = vmatpush1.bf16.msra.mxu0 0
  %1866 = vmatprep.subr.bf16.mxu0 0
  %1867 = vmatpush1.bf16.msra.mxu0 0
  %1868 = vmatprep.subr.bf16.mxu0 0
  %1869 = vmatpush1.bf16.msra.mxu0 0
  %1870 = vmatprep.mubr.bf16.mxu0 0
  %1871 = vmatmul.mubr.bf16.gmra.mrb[0].mxu0 %v1730
  %v1872 = vpop.f32.mrb[0].mxu0
  %v1873 = vadd.f32 0.0, %v1872
  %v1874 = vpop.f32.mrb[0].mxu0
  %v1875 = vadd.f32 0.0, %v1874
  %v1876 = vpop.f32.mrb[0].mxu0
  %v1877 = vpop.f32.mrb[0].mxu0
  %1878 = vdwg.mxu0
  %1879 = vmatprep.subr.bf16.mxu0 %v1754
  %1880 = vmatpush1.bf16.msra.mxu0 %v1751
  %1881 = vmatprep.subr.bf16.mxu0 0
  %1882 = vmatpush1.bf16.msra.mxu0 0
  %1883 = vmatprep.subr.bf16.mxu0 0
  %1884 = vmatpush1.bf16.msra.mxu0 0
  %1885 = vmatprep.subr.bf16.mxu0 0
  %1886 = vmatpush1.bf16.msra.mxu0 0
  %1887 = vmatprep.subr.bf16.mxu0 0
  %1888 = vmatpush1.bf16.msra.mxu0 0
  %1889 = vmatprep.subr.bf16.mxu0 0
  %1890 = vmatpush1.bf16.msra.mxu0 0
  %1891 = vmatprep.subr.bf16.mxu0 0
  %1892 = vmatpush1.bf16.msra.mxu0 0
  %1893 = vmatprep.subr.bf16.mxu0 0
  %1894 = vmatpush1.bf16.msra.mxu0 0
  %1895 = vmatprep.subr.bf16.mxu0 0
  %1896 = vmatpush1.bf16.msra.mxu0 0
  %1897 = vmatprep.subr.bf16.mxu0 0
  %1898 = vmatpush1.bf16.msra.mxu0 0
  %1899 = vmatprep.subr.bf16.mxu0 0
  %1900 = vmatpush1.bf16.msra.mxu0 0
  %1901 = vmatprep.subr.bf16.mxu0 0
  %1902 = vmatpush1.bf16.msra.mxu0 0
  %1903 = vmatprep.subr.bf16.mxu0 0
  %1904 = vmatpush1.bf16.msra.mxu0 0
  %1905 = vmatprep.subr.bf16.mxu0 0
  %1906 = vmatpush1.bf16.msra.mxu0 0
  %1907 = vmatprep.subr.bf16.mxu0 0
  %1908 = vmatpush1.bf16.msra.mxu0 0
  %1909 = vmatprep.subr.bf16.mxu0 0
  %1910 = vmatpush1.bf16.msra.mxu0 0
  %1911 = vmatprep.mubr.bf16.mxu0 0
  %1912 = vmatmul.mubr.bf16.gmra.mrb[0].mxu0 %v1730
  %v1913 = vpop.f32.mrb[0].mxu0
  %v1914 = vadd.f32 0.0, %v1913
  %v1915 = vpop.f32.mrb[0].mxu0
  %v1916 = vadd.f32 0.0, %v1915
  %v1917 = vpop.f32.mrb[0].mxu0
  %v1918 = vpop.f32.mrb[0].mxu0
  %1919 = vdwg.mxu0
  %v1920 = vadd.f32 %v1694, %v1791
  %v1921 = vadd.f32 %v1695, %v1793
  %v1922 = vadd.f32 %v1696, %v1832
  %v1923 = vadd.f32 %v1697, %v1834
  %v1924 = vadd.f32 %v1698, %v1873
  %v1925 = vadd.f32 %v1699, %v1875
  %v1926 = vadd.f32 %v1700, %v1914
  %v1927 = vadd.f32 %v1701, %v1916
  %1928 = vrot.lane.b32.xlu0 %v125, 89
  %v1929 = vpop.permute.xlu0 %1928
  %1930 = vrot.lane.b32.xlu0 %v126, 89
  %v1931 = vpop.permute.xlu0 %1930
  %1932 = vrot.lane.b32.xlu0 %v127, 89
  %v1933 = vpop.permute.xlu0 %1932
  %1934 = vrot.lane.b32.xlu0 %v128, 89
  %v1935 = vpop.permute.xlu0 %1934
  %1936 = vrot.lane.b32.xlu0 %v129, 89
  %v1937 = vpop.permute.xlu0 %1936
  %1938 = vrot.lane.b32.xlu0 %v130, 89
  %v1939 = vpop.permute.xlu0 %1938
  %1940 = vrot.lane.b32.xlu0 %v131, 89
  %v1941 = vpop.permute.xlu0 %1940
  %1942 = vrot.lane.b32.xlu0 %v132, 89
  %v1943 = vpop.permute.xlu0 %1942
  %1944 = vrot.lane.b32.xlu0 %v133, 89
  %v1945 = vpop.permute.xlu0 %1944
  %vm1946 = vcmask 728064
  %v1947 = vsel %vm1946, %v1929, %v1931
  %v1948 = vsel %vm1946, %v1931, %v1933
  %v1949 = vsel %vm1946, %v1933, %v1935
  %v1950 = vsel %vm1946, %v1935, %v1937
  %v1951 = vsel %vm1946, %v1937, %v1939
  %v1952 = vsel %vm1946, %v1939, %v1941
  %v1953 = vsel %vm1946, %v1941, %v1943
  %v1954 = vsel %vm1946, %v1943, %v1945
  %v1956 = vsel %vm161, %v87, 0
  %v1959 = vsel %vm165, %v1947, 0
  %v1962 = vsel %vm165, %v1948, 0
  %v1965 = vsel %vm165, %v1949, 0
  %v1968 = vsel %vm165, %v1950, 0
  %v1971 = vsel %vm165, %v1951, 0
  %v1974 = vsel %vm165, %v1952, 0
  %v1977 = vsel %vm165, %v1953, 0
  %v1980 = vsel %vm165, %v1954, 0
  %1982 = vmatprep.subr.bf16.mxu0 %v1962
  %1983 = vmatpush1.bf16.msra.mxu0 %v1959
  %1984 = vmatprep.subr.bf16.mxu0 0
  %1985 = vmatpush1.bf16.msra.mxu0 0
  %1986 = vmatprep.subr.bf16.mxu0 0
  %1987 = vmatpush1.bf16.msra.mxu0 0
  %1988 = vmatprep.subr.bf16.mxu0 0
  %1989 = vmatpush1.bf16.msra.mxu0 0
  %1990 = vmatprep.subr.bf16.mxu0 0
  %1991 = vmatpush1.bf16.msra.mxu0 0
  %1992 = vmatprep.subr.bf16.mxu0 0
  %1993 = vmatpush1.bf16.msra.mxu0 0
  %1994 = vmatprep.subr.bf16.mxu0 0
  %1995 = vmatpush1.bf16.msra.mxu0 0
  %1996 = vmatprep.subr.bf16.mxu0 0
  %1997 = vmatpush1.bf16.msra.mxu0 0
  %1998 = vmatprep.subr.bf16.mxu0 0
  %1999 = vmatpush1.bf16.msra.mxu0 0
  %2000 = vmatprep.subr.bf16.mxu0 0
  %2001 = vmatpush1.bf16.msra.mxu0 0
  %2002 = vmatprep.subr.bf16.mxu0 0
  %2003 = vmatpush1.bf16.msra.mxu0 0
  %2004 = vmatprep.subr.bf16.mxu0 0
  %2005 = vmatpush1.bf16.msra.mxu0 0
  %2006 = vmatprep.subr.bf16.mxu0 0
  %2007 = vmatpush1.bf16.msra.mxu0 0
  %2008 = vmatprep.subr.bf16.mxu0 0
  %2009 = vmatpush1.bf16.msra.mxu0 0
  %2010 = vmatprep.subr.bf16.mxu0 0
  %2011 = vmatpush1.bf16.msra.mxu0 0
  %2012 = vmatprep.subr.bf16.mxu0 0
  %2013 = vmatpush1.bf16.msra.mxu0 0
  %2014 = vmatprep.mubr.bf16.mxu0 0
  %2015 = vmatmul.mubr.bf16.gmra.mrb[0].mxu0 %v1956
  %v2016 = vpop.f32.mrb[0].mxu0
  %v2017 = vadd.f32 0.0, %v2016
  %v2018 = vpop.f32.mrb[0].mxu0
  %v2019 = vadd.f32 0.0, %v2018
  %v2020 = vpop.f32.mrb[0].mxu0
  %v2021 = vpop.f32.mrb[0].mxu0
  %2022 = vdwg.mxu0
  %2023 = vmatprep.subr.bf16.mxu0 %v1968
  %2024 = vmatpush1.bf16.msra.mxu0 %v1965
  %2025 = vmatprep.subr.bf16.mxu0 0
  %2026 = vmatpush1.bf16.msra.mxu0 0
  %2027 = vmatprep.subr.bf16.mxu0 0
  %2028 = vmatpush1.bf16.msra.mxu0 0
  %2029 = vmatprep.subr.bf16.mxu0 0
  %2030 = vmatpush1.bf16.msra.mxu0 0
  %2031 = vmatprep.subr.bf16.mxu0 0
  %2032 = vmatpush1.bf16.msra.mxu0 0
  %2033 = vmatprep.subr.bf16.mxu0 0
  %2034 = vmatpush1.bf16.msra.mxu0 0
  %2035 = vmatprep.subr.bf16.mxu0 0
  %2036 = vmatpush1.bf16.msra.mxu0 0
  %2037 = vmatprep.subr.bf16.mxu0 0
  %2038 = vmatpush1.bf16.msra.mxu0 0
  %2039 = vmatprep.subr.bf16.mxu0 0
  %2040 = vmatpush1.bf16.msra.mxu0 0
  %2041 = vmatprep.subr.bf16.mxu0 0
  %2042 = vmatpush1.bf16.msra.mxu0 0
  %2043 = vmatprep.subr.bf16.mxu0 0
  %2044 = vmatpush1.bf16.msra.mxu0 0
  %2045 = vmatprep.subr.bf16.mxu0 0
  %2046 = vmatpush1.bf16.msra.mxu0 0
  %2047 = vmatprep.subr.bf16.mxu0 0
  %2048 = vmatpush1.bf16.msra.mxu0 0
  %2049 = vmatprep.subr.bf16.mxu0 0
  %2050 = vmatpush1.bf16.msra.mxu0 0
  %2051 = vmatprep.subr.bf16.mxu0 0
  %2052 = vmatpush1.bf16.msra.mxu0 0
  %2053 = vmatprep.subr.bf16.mxu0 0
  %2054 = vmatpush1.bf16.msra.mxu0 0
  %2055 = vmatprep.mubr.bf16.mxu0 0
  %2056 = vmatmul.mubr.bf16.gmra.mrb[0].mxu0 %v1956
  %v2057 = vpop.f32.mrb[0].mxu0
  %v2058 = vadd.f32 0.0, %v2057
  %v2059 = vpop.f32.mrb[0].mxu0
  %v2060 = vadd.f32 0.0, %v2059
  %v2061 = vpop.f32.mrb[0].mxu0
  %v2062 = vpop.f32.mrb[0].mxu0
  %2063 = vdwg.mxu0
  %2064 = vmatprep.subr.bf16.mxu0 %v1974
  %2065 = vmatpush1.bf16.msra.mxu0 %v1971
  %2066 = vmatprep.subr.bf16.mxu0 0
  %2067 = vmatpush1.bf16.msra.mxu0 0
  %2068 = vmatprep.subr.bf16.mxu0 0
  %2069 = vmatpush1.bf16.msra.mxu0 0
  %2070 = vmatprep.subr.bf16.mxu0 0
  %2071 = vmatpush1.bf16.msra.mxu0 0
  %2072 = vmatprep.subr.bf16.mxu0 0
  %2073 = vmatpush1.bf16.msra.mxu0 0
  %2074 = vmatprep.subr.bf16.mxu0 0
  %2075 = vmatpush1.bf16.msra.mxu0 0
  %2076 = vmatprep.subr.bf16.mxu0 0
  %2077 = vmatpush1.bf16.msra.mxu0 0
  %2078 = vmatprep.subr.bf16.mxu0 0
  %2079 = vmatpush1.bf16.msra.mxu0 0
  %2080 = vmatprep.subr.bf16.mxu0 0
  %2081 = vmatpush1.bf16.msra.mxu0 0
  %2082 = vmatprep.subr.bf16.mxu0 0
  %2083 = vmatpush1.bf16.msra.mxu0 0
  %2084 = vmatprep.subr.bf16.mxu0 0
  %2085 = vmatpush1.bf16.msra.mxu0 0
  %2086 = vmatprep.subr.bf16.mxu0 0
  %2087 = vmatpush1.bf16.msra.mxu0 0
  %2088 = vmatprep.subr.bf16.mxu0 0
  %2089 = vmatpush1.bf16.msra.mxu0 0
  %2090 = vmatprep.subr.bf16.mxu0 0
  %2091 = vmatpush1.bf16.msra.mxu0 0
  %2092 = vmatprep.subr.bf16.mxu0 0
  %2093 = vmatpush1.bf16.msra.mxu0 0
  %2094 = vmatprep.subr.bf16.mxu0 0
  %2095 = vmatpush1.bf16.msra.mxu0 0
  %2096 = vmatprep.mubr.bf16.mxu0 0
  %2097 = vmatmul.mubr.bf16.gmra.mrb[0].mxu0 %v1956
  %v2098 = vpop.f32.mrb[0].mxu0
  %v2099 = vadd.f32 0.0, %v2098
  %v2100 = vpop.f32.mrb[0].mxu0
  %v2101 = vadd.f32 0.0, %v2100
  %v2102 = vpop.f32.mrb[0].mxu0
  %v2103 = vpop.f32.mrb[0].mxu0
  %2104 = vdwg.mxu0
  %2105 = vmatprep.subr.bf16.mxu0 %v1980
  %2106 = vmatpush1.bf16.msra.mxu0 %v1977
  %2107 = vmatprep.subr.bf16.mxu0 0
  %2108 = vmatpush1.bf16.msra.mxu0 0
  %2109 = vmatprep.subr.bf16.mxu0 0
  %2110 = vmatpush1.bf16.msra.mxu0 0
  %2111 = vmatprep.subr.bf16.mxu0 0
  %2112 = vmatpush1.bf16.msra.mxu0 0
  %2113 = vmatprep.subr.bf16.mxu0 0
  %2114 = vmatpush1.bf16.msra.mxu0 0
  %2115 = vmatprep.subr.bf16.mxu0 0
  %2116 = vmatpush1.bf16.msra.mxu0 0
  %2117 = vmatprep.subr.bf16.mxu0 0
  %2118 = vmatpush1.bf16.msra.mxu0 0
  %2119 = vmatprep.subr.bf16.mxu0 0
  %2120 = vmatpush1.bf16.msra.mxu0 0
  %2121 = vmatprep.subr.bf16.mxu0 0
  %2122 = vmatpush1.bf16.msra.mxu0 0
  %2123 = vmatprep.subr.bf16.mxu0 0
  %2124 = vmatpush1.bf16.msra.mxu0 0
  %2125 = vmatprep.subr.bf16.mxu0 0
  %2126 = vmatpush1.bf16.msra.mxu0 0
  %2127 = vmatprep.subr.bf16.mxu0 0
  %2128 = vmatpush1.bf16.msra.mxu0 0
  %2129 = vmatprep.subr.bf16.mxu0 0
  %2130 = vmatpush1.bf16.msra.mxu0 0
  %2131 = vmatprep.subr.bf16.mxu0 0
  %2132 = vmatpush1.bf16.msra.mxu0 0
  %2133 = vmatprep.subr.bf16.mxu0 0
  %2134 = vmatpush1.bf16.msra.mxu0 0
  %2135 = vmatprep.subr.bf16.mxu0 0
  %2136 = vmatpush1.bf16.msra.mxu0 0
  %2137 = vmatprep.mubr.bf16.mxu0 0
  %2138 = vmatmul.mubr.bf16.gmra.mrb[0].mxu0 %v1956
  %v2139 = vpop.f32.mrb[0].mxu0
  %v2140 = vadd.f32 0.0, %v2139
  %v2141 = vpop.f32.mrb[0].mxu0
  %v2142 = vadd.f32 0.0, %v2141
  %v2143 = vpop.f32.mrb[0].mxu0
  %v2144 = vpop.f32.mrb[0].mxu0
  %2145 = vdwg.mxu0
  %v2146 = vadd.f32 %v1920, %v2017
  %v2147 = vadd.f32 %v1921, %v2019
  %v2148 = vadd.f32 %v1922, %v2058
  %v2149 = vadd.f32 %v1923, %v2060
  %v2150 = vadd.f32 %v1924, %v2099
  %v2151 = vadd.f32 %v1925, %v2101
  %v2152 = vadd.f32 %v1926, %v2140
  %v2153 = vadd.f32 %v1927, %v2142
  %2154 = vrot.lane.b32.xlu0 %v125, 11
  %v2155 = vpop.permute.xlu0 %2154
  %2156 = vrot.lane.b32.xlu0 %v126, 11
  %v2157 = vpop.permute.xlu0 %2156
  %2158 = vrot.lane.b32.xlu0 %v127, 11
  %v2159 = vpop.permute.xlu0 %2158
  %2160 = vrot.lane.b32.xlu0 %v128, 11
  %v2161 = vpop.permute.xlu0 %2160
  %2162 = vrot.lane.b32.xlu0 %v129, 11
  %v2163 = vpop.permute.xlu0 %2162
  %2164 = vrot.lane.b32.xlu0 %v130, 11
  %v2165 = vpop.permute.xlu0 %2164
  %2166 = vrot.lane.b32.xlu0 %v131, 11
  %v2167 = vpop.permute.xlu0 %2166
  %2168 = vrot.lane.b32.xlu0 %v132, 11
  %v2169 = vpop.permute.xlu0 %2168
  %2170 = vrot.lane.b32.xlu0 %v133, 11
  %v2171 = vpop.permute.xlu0 %2170
  %vm2172 = vcmask 89088
  %v2173 = vsel %vm2172, %v2155, %v2157
  %v2174 = vsel %vm2172, %v2157, %v2159
  %v2175 = vsel %vm2172, %v2159, %v2161
  %v2176 = vsel %vm2172, %v2161, %v2163
  %v2177 = vsel %vm2172, %v2163, %v2165
  %v2178 = vsel %vm2172, %v2165, %v2167
  %v2179 = vsel %vm2172, %v2167, %v2169
  %v2180 = vsel %vm2172, %v2169, %v2171
  %v2182 = vsel %vm161, %v88, 0
  %v2185 = vsel %vm165, %v2173, 0
  %v2188 = vsel %vm165, %v2174, 0
  %v2191 = vsel %vm165, %v2175, 0
  %v2194 = vsel %vm165, %v2176, 0
  %v2197 = vsel %vm165, %v2177, 0
  %v2200 = vsel %vm165, %v2178, 0
  %v2203 = vsel %vm165, %v2179, 0
  %v2206 = vsel %vm165, %v2180, 0
  %2208 = vmatprep.subr.bf16.mxu0 %v2188
  %2209 = vmatpush1.bf16.msra.mxu0 %v2185
  %2210 = vmatprep.subr.bf16.mxu0 0
  %2211 = vmatpush1.bf16.msra.mxu0 0
  %2212 = vmatprep.subr.bf16.mxu0 0
  %2213 = vmatpush1.bf16.msra.mxu0 0
  %2214 = vmatprep.subr.bf16.mxu0 0
  %2215 = vmatpush1.bf16.msra.mxu0 0
  %2216 = vmatprep.subr.bf16.mxu0 0
  %2217 = vmatpush1.bf16.msra.mxu0 0
  %2218 = vmatprep.subr.bf16.mxu0 0
  %2219 = vmatpush1.bf16.msra.mxu0 0
  %2220 = vmatprep.subr.bf16.mxu0 0
  %2221 = vmatpush1.bf16.msra.mxu0 0
  %2222 = vmatprep.subr.bf16.mxu0 0
  %2223 = vmatpush1.bf16.msra.mxu0 0
  %2224 = vmatprep.subr.bf16.mxu0 0
  %2225 = vmatpush1.bf16.msra.mxu0 0
  %2226 = vmatprep.subr.bf16.mxu0 0
  %2227 = vmatpush1.bf16.msra.mxu0 0
  %2228 = vmatprep.subr.bf16.mxu0 0
  %2229 = vmatpush1.bf16.msra.mxu0 0
  %2230 = vmatprep.subr.bf16.mxu0 0
  %2231 = vmatpush1.bf16.msra.mxu0 0
  %2232 = vmatprep.subr.bf16.mxu0 0
  %2233 = vmatpush1.bf16.msra.mxu0 0
  %2234 = vmatprep.subr.bf16.mxu0 0
  %2235 = vmatpush1.bf16.msra.mxu0 0
  %2236 = vmatprep.subr.bf16.mxu0 0
  %2237 = vmatpush1.bf16.msra.mxu0 0
  %2238 = vmatprep.subr.bf16.mxu0 0
  %2239 = vmatpush1.bf16.msra.mxu0 0
  %2240 = vmatprep.mubr.bf16.mxu0 0
  %2241 = vmatmul.mubr.bf16.gmra.mrb[0].mxu0 %v2182
  %v2242 = vpop.f32.mrb[0].mxu0
  %v2243 = vadd.f32 0.0, %v2242
  %v2244 = vpop.f32.mrb[0].mxu0
  %v2245 = vadd.f32 0.0, %v2244
  %v2246 = vpop.f32.mrb[0].mxu0
  %v2247 = vpop.f32.mrb[0].mxu0
  %2248 = vdwg.mxu0
  %2249 = vmatprep.subr.bf16.mxu0 %v2194
  %2250 = vmatpush1.bf16.msra.mxu0 %v2191
  %2251 = vmatprep.subr.bf16.mxu0 0
  %2252 = vmatpush1.bf16.msra.mxu0 0
  %2253 = vmatprep.subr.bf16.mxu0 0
  %2254 = vmatpush1.bf16.msra.mxu0 0
  %2255 = vmatprep.subr.bf16.mxu0 0
  %2256 = vmatpush1.bf16.msra.mxu0 0
  %2257 = vmatprep.subr.bf16.mxu0 0
  %2258 = vmatpush1.bf16.msra.mxu0 0
  %2259 = vmatprep.subr.bf16.mxu0 0
  %2260 = vmatpush1.bf16.msra.mxu0 0
  %2261 = vmatprep.subr.bf16.mxu0 0
  %2262 = vmatpush1.bf16.msra.mxu0 0
  %2263 = vmatprep.subr.bf16.mxu0 0
  %2264 = vmatpush1.bf16.msra.mxu0 0
  %2265 = vmatprep.subr.bf16.mxu0 0
  %2266 = vmatpush1.bf16.msra.mxu0 0
  %2267 = vmatprep.subr.bf16.mxu0 0
  %2268 = vmatpush1.bf16.msra.mxu0 0
  %2269 = vmatprep.subr.bf16.mxu0 0
  %2270 = vmatpush1.bf16.msra.mxu0 0
  %2271 = vmatprep.subr.bf16.mxu0 0
  %2272 = vmatpush1.bf16.msra.mxu0 0
  %2273 = vmatprep.subr.bf16.mxu0 0
  %2274 = vmatpush1.bf16.msra.mxu0 0
  %2275 = vmatprep.subr.bf16.mxu0 0
  %2276 = vmatpush1.bf16.msra.mxu0 0
  %2277 = vmatprep.subr.bf16.mxu0 0
  %2278 = vmatpush1.bf16.msra.mxu0 0
  %2279 = vmatprep.subr.bf16.mxu0 0
  %2280 = vmatpush1.bf16.msra.mxu0 0
  %2281 = vmatprep.mubr.bf16.mxu0 0
  %2282 = vmatmul.mubr.bf16.gmra.mrb[0].mxu0 %v2182
  %v2283 = vpop.f32.mrb[0].mxu0
  %v2284 = vadd.f32 0.0, %v2283
  %v2285 = vpop.f32.mrb[0].mxu0
  %v2286 = vadd.f32 0.0, %v2285
  %v2287 = vpop.f32.mrb[0].mxu0
  %v2288 = vpop.f32.mrb[0].mxu0
  %2289 = vdwg.mxu0
  %2290 = vmatprep.subr.bf16.mxu0 %v2200
  %2291 = vmatpush1.bf16.msra.mxu0 %v2197
  %2292 = vmatprep.subr.bf16.mxu0 0
  %2293 = vmatpush1.bf16.msra.mxu0 0
  %2294 = vmatprep.subr.bf16.mxu0 0
  %2295 = vmatpush1.bf16.msra.mxu0 0
  %2296 = vmatprep.subr.bf16.mxu0 0
  %2297 = vmatpush1.bf16.msra.mxu0 0
  %2298 = vmatprep.subr.bf16.mxu0 0
  %2299 = vmatpush1.bf16.msra.mxu0 0
  %2300 = vmatprep.subr.bf16.mxu0 0
  %2301 = vmatpush1.bf16.msra.mxu0 0
  %2302 = vmatprep.subr.bf16.mxu0 0
  %2303 = vmatpush1.bf16.msra.mxu0 0
  %2304 = vmatprep.subr.bf16.mxu0 0
  %2305 = vmatpush1.bf16.msra.mxu0 0
  %2306 = vmatprep.subr.bf16.mxu0 0
  %2307 = vmatpush1.bf16.msra.mxu0 0
  %2308 = vmatprep.subr.bf16.mxu0 0
  %2309 = vmatpush1.bf16.msra.mxu0 0
  %2310 = vmatprep.subr.bf16.mxu0 0
  %2311 = vmatpush1.bf16.msra.mxu0 0
  %2312 = vmatprep.subr.bf16.mxu0 0
  %2313 = vmatpush1.bf16.msra.mxu0 0
  %2314 = vmatprep.subr.bf16.mxu0 0
  %2315 = vmatpush1.bf16.msra.mxu0 0
  %2316 = vmatprep.subr.bf16.mxu0 0
  %2317 = vmatpush1.bf16.msra.mxu0 0
  %2318 = vmatprep.subr.bf16.mxu0 0
  %2319 = vmatpush1.bf16.msra.mxu0 0
  %2320 = vmatprep.subr.bf16.mxu0 0
  %2321 = vmatpush1.bf16.msra.mxu0 0
  %2322 = vmatprep.mubr.bf16.mxu0 0
  %2323 = vmatmul.mubr.bf16.gmra.mrb[0].mxu0 %v2182
  %v2324 = vpop.f32.mrb[0].mxu0
  %v2325 = vadd.f32 0.0, %v2324
  %v2326 = vpop.f32.mrb[0].mxu0
  %v2327 = vadd.f32 0.0, %v2326
  %v2328 = vpop.f32.mrb[0].mxu0
  %v2329 = vpop.f32.mrb[0].mxu0
  %2330 = vdwg.mxu0
  %2331 = vmatprep.subr.bf16.mxu0 %v2206
  %2332 = vmatpush1.bf16.msra.mxu0 %v2203
  %2333 = vmatprep.subr.bf16.mxu0 0
  %2334 = vmatpush1.bf16.msra.mxu0 0
  %2335 = vmatprep.subr.bf16.mxu0 0
  %2336 = vmatpush1.bf16.msra.mxu0 0
  %2337 = vmatprep.subr.bf16.mxu0 0
  %2338 = vmatpush1.bf16.msra.mxu0 0
  %2339 = vmatprep.subr.bf16.mxu0 0
  %2340 = vmatpush1.bf16.msra.mxu0 0
  %2341 = vmatprep.subr.bf16.mxu0 0
  %2342 = vmatpush1.bf16.msra.mxu0 0
  %2343 = vmatprep.subr.bf16.mxu0 0
  %2344 = vmatpush1.bf16.msra.mxu0 0
  %2345 = vmatprep.subr.bf16.mxu0 0
  %2346 = vmatpush1.bf16.msra.mxu0 0
  %2347 = vmatprep.subr.bf16.mxu0 0
  %2348 = vmatpush1.bf16.msra.mxu0 0
  %2349 = vmatprep.subr.bf16.mxu0 0
  %2350 = vmatpush1.bf16.msra.mxu0 0
  %2351 = vmatprep.subr.bf16.mxu0 0
  %2352 = vmatpush1.bf16.msra.mxu0 0
  %2353 = vmatprep.subr.bf16.mxu0 0
  %2354 = vmatpush1.bf16.msra.mxu0 0
  %2355 = vmatprep.subr.bf16.mxu0 0
  %2356 = vmatpush1.bf16.msra.mxu0 0
  %2357 = vmatprep.subr.bf16.mxu0 0
  %2358 = vmatpush1.bf16.msra.mxu0 0
  %2359 = vmatprep.subr.bf16.mxu0 0
  %2360 = vmatpush1.bf16.msra.mxu0 0
  %2361 = vmatprep.subr.bf16.mxu0 0
  %2362 = vmatpush1.bf16.msra.mxu0 0
  %2363 = vmatprep.mubr.bf16.mxu0 0
  %2364 = vmatmul.mubr.bf16.gmra.mrb[0].mxu0 %v2182
  %v2365 = vpop.f32.mrb[0].mxu0
  %v2366 = vadd.f32 0.0, %v2365
  %v2367 = vpop.f32.mrb[0].mxu0
  %v2368 = vadd.f32 0.0, %v2367
  %v2369 = vpop.f32.mrb[0].mxu0
  %v2370 = vpop.f32.mrb[0].mxu0
  %2371 = vdwg.mxu0
  %v2372 = vadd.f32 %v2146, %v2243
  %v2373 = vadd.f32 %v2147, %v2245
  %v2374 = vadd.f32 %v2148, %v2284
  %v2375 = vadd.f32 %v2149, %v2286
  %v2376 = vadd.f32 %v2150, %v2325
  %v2377 = vadd.f32 %v2151, %v2327
  %v2378 = vadd.f32 %v2152, %v2366
  %v2379 = vadd.f32 %v2153, %v2368
  %2380 = vrot.lane.b32.xlu0 %v125, 10
  %v2381 = vpop.permute.xlu0 %2380
  %2382 = vrot.lane.b32.xlu0 %v126, 10
  %v2383 = vpop.permute.xlu0 %2382
  %2384 = vrot.lane.b32.xlu0 %v127, 10
  %v2385 = vpop.permute.xlu0 %2384
  %2386 = vrot.lane.b32.xlu0 %v128, 10
  %v2387 = vpop.permute.xlu0 %2386
  %2388 = vrot.lane.b32.xlu0 %v129, 10
  %v2389 = vpop.permute.xlu0 %2388
  %2390 = vrot.lane.b32.xlu0 %v130, 10
  %v2391 = vpop.permute.xlu0 %2390
  %2392 = vrot.lane.b32.xlu0 %v131, 10
  %v2393 = vpop.permute.xlu0 %2392
  %2394 = vrot.lane.b32.xlu0 %v132, 10
  %v2395 = vpop.permute.xlu0 %2394
  %2396 = vrot.lane.b32.xlu0 %v133, 10
  %v2397 = vpop.permute.xlu0 %2396
  %vm2398 = vcmask 80896
  %v2399 = vsel %vm2398, %v2381, %v2383
  %v2400 = vsel %vm2398, %v2383, %v2385
  %v2401 = vsel %vm2398, %v2385, %v2387
  %v2402 = vsel %vm2398, %v2387, %v2389
  %v2403 = vsel %vm2398, %v2389, %v2391
  %v2404 = vsel %vm2398, %v2391, %v2393
  %v2405 = vsel %vm2398, %v2393, %v2395
  %v2406 = vsel %vm2398, %v2395, %v2397
  %v2408 = vsel %vm161, %v89, 0
  %v2411 = vsel %vm165, %v2399, 0
  %v2414 = vsel %vm165, %v2400, 0
  %v2417 = vsel %vm165, %v2401, 0
  %v2420 = vsel %vm165, %v2402, 0
  %v2423 = vsel %vm165, %v2403, 0
  %v2426 = vsel %vm165, %v2404, 0
  %v2429 = vsel %vm165, %v2405, 0
  %v2432 = vsel %vm165, %v2406, 0
  %2434 = vmatprep.subr.bf16.mxu0 %v2414
  %2435 = vmatpush1.bf16.msra.mxu0 %v2411
  %2436 = vmatprep.subr.bf16.mxu0 0
  %2437 = vmatpush1.bf16.msra.mxu0 0
  %2438 = vmatprep.subr.bf16.mxu0 0
  %2439 = vmatpush1.bf16.msra.mxu0 0
  %2440 = vmatprep.subr.bf16.mxu0 0
  %2441 = vmatpush1.bf16.msra.mxu0 0
  %2442 = vmatprep.subr.bf16.mxu0 0
  %2443 = vmatpush1.bf16.msra.mxu0 0
  %2444 = vmatprep.subr.bf16.mxu0 0
  %2445 = vmatpush1.bf16.msra.mxu0 0
  %2446 = vmatprep.subr.bf16.mxu0 0
  %2447 = vmatpush1.bf16.msra.mxu0 0
  %2448 = vmatprep.subr.bf16.mxu0 0
  %2449 = vmatpush1.bf16.msra.mxu0 0
  %2450 = vmatprep.subr.bf16.mxu0 0
  %2451 = vmatpush1.bf16.msra.mxu0 0
  %2452 = vmatprep.subr.bf16.mxu0 0
  %2453 = vmatpush1.bf16.msra.mxu0 0
  %2454 = vmatprep.subr.bf16.mxu0 0
  %2455 = vmatpush1.bf16.msra.mxu0 0
  %2456 = vmatprep.subr.bf16.mxu0 0
  %2457 = vmatpush1.bf16.msra.mxu0 0
  %2458 = vmatprep.subr.bf16.mxu0 0
  %2459 = vmatpush1.bf16.msra.mxu0 0
  %2460 = vmatprep.subr.bf16.mxu0 0
  %2461 = vmatpush1.bf16.msra.mxu0 0
  %2462 = vmatprep.subr.bf16.mxu0 0
  %2463 = vmatpush1.bf16.msra.mxu0 0
  %2464 = vmatprep.subr.bf16.mxu0 0
  %2465 = vmatpush1.bf16.msra.mxu0 0
  %2466 = vmatprep.mubr.bf16.mxu0 0
  %2467 = vmatmul.mubr.bf16.gmra.mrb[0].mxu0 %v2408
  %v2468 = vpop.f32.mrb[0].mxu0
  %v2469 = vadd.f32 0.0, %v2468
  %v2470 = vpop.f32.mrb[0].mxu0
  %v2471 = vadd.f32 0.0, %v2470
  %v2472 = vpop.f32.mrb[0].mxu0
  %v2473 = vpop.f32.mrb[0].mxu0
  %2474 = vdwg.mxu0
  %2475 = vmatprep.subr.bf16.mxu0 %v2420
  %2476 = vmatpush1.bf16.msra.mxu0 %v2417
  %2477 = vmatprep.subr.bf16.mxu0 0
  %2478 = vmatpush1.bf16.msra.mxu0 0
  %2479 = vmatprep.subr.bf16.mxu0 0
  %2480 = vmatpush1.bf16.msra.mxu0 0
  %2481 = vmatprep.subr.bf16.mxu0 0
  %2482 = vmatpush1.bf16.msra.mxu0 0
  %2483 = vmatprep.subr.bf16.mxu0 0
  %2484 = vmatpush1.bf16.msra.mxu0 0
  %2485 = vmatprep.subr.bf16.mxu0 0
  %2486 = vmatpush1.bf16.msra.mxu0 0
  %2487 = vmatprep.subr.bf16.mxu0 0
  %2488 = vmatpush1.bf16.msra.mxu0 0
  %2489 = vmatprep.subr.bf16.mxu0 0
  %2490 = vmatpush1.bf16.msra.mxu0 0
  %2491 = vmatprep.subr.bf16.mxu0 0
  %2492 = vmatpush1.bf16.msra.mxu0 0
  %2493 = vmatprep.subr.bf16.mxu0 0
  %2494 = vmatpush1.bf16.msra.mxu0 0
  %2495 = vmatprep.subr.bf16.mxu0 0
  %2496 = vmatpush1.bf16.msra.mxu0 0
  %2497 = vmatprep.subr.bf16.mxu0 0
  %2498 = vmatpush1.bf16.msra.mxu0 0
  %2499 = vmatprep.subr.bf16.mxu0 0
  %2500 = vmatpush1.bf16.msra.mxu0 0
  %2501 = vmatprep.subr.bf16.mxu0 0
  %2502 = vmatpush1.bf16.msra.mxu0 0
  %2503 = vmatprep.subr.bf16.mxu0 0
  %2504 = vmatpush1.bf16.msra.mxu0 0
  %2505 = vmatprep.subr.bf16.mxu0 0
  %2506 = vmatpush1.bf16.msra.mxu0 0
  %2507 = vmatprep.mubr.bf16.mxu0 0
  %2508 = vmatmul.mubr.bf16.gmra.mrb[0].mxu0 %v2408
  %v2509 = vpop.f32.mrb[0].mxu0
  %v2510 = vadd.f32 0.0, %v2509
  %v2511 = vpop.f32.mrb[0].mxu0
  %v2512 = vadd.f32 0.0, %v2511
  %v2513 = vpop.f32.mrb[0].mxu0
  %v2514 = vpop.f32.mrb[0].mxu0
  %2515 = vdwg.mxu0
  %2516 = vmatprep.subr.bf16.mxu0 %v2426
  %2517 = vmatpush1.bf16.msra.mxu0 %v2423
  %2518 = vmatprep.subr.bf16.mxu0 0
  %2519 = vmatpush1.bf16.msra.mxu0 0
  %2520 = vmatprep.subr.bf16.mxu0 0
  %2521 = vmatpush1.bf16.msra.mxu0 0
  %2522 = vmatprep.subr.bf16.mxu0 0
  %2523 = vmatpush1.bf16.msra.mxu0 0
  %2524 = vmatprep.subr.bf16.mxu0 0
  %2525 = vmatpush1.bf16.msra.mxu0 0
  %2526 = vmatprep.subr.bf16.mxu0 0
  %2527 = vmatpush1.bf16.msra.mxu0 0
  %2528 = vmatprep.subr.bf16.mxu0 0
  %2529 = vmatpush1.bf16.msra.mxu0 0
  %2530 = vmatprep.subr.bf16.mxu0 0
  %2531 = vmatpush1.bf16.msra.mxu0 0
  %2532 = vmatprep.subr.bf16.mxu0 0
  %2533 = vmatpush1.bf16.msra.mxu0 0
  %2534 = vmatprep.subr.bf16.mxu0 0
  %2535 = vmatpush1.bf16.msra.mxu0 0
  %2536 = vmatprep.subr.bf16.mxu0 0
  %2537 = vmatpush1.bf16.msra.mxu0 0
  %2538 = vmatprep.subr.bf16.mxu0 0
  %2539 = vmatpush1.bf16.msra.mxu0 0
  %2540 = vmatprep.subr.bf16.mxu0 0
  %2541 = vmatpush1.bf16.msra.mxu0 0
  %2542 = vmatprep.subr.bf16.mxu0 0
  %2543 = vmatpush1.bf16.msra.mxu0 0
  %2544 = vmatprep.subr.bf16.mxu0 0
  %2545 = vmatpush1.bf16.msra.mxu0 0
  %2546 = vmatprep.subr.bf16.mxu0 0
  %2547 = vmatpush1.bf16.msra.mxu0 0
  %2548 = vmatprep.mubr.bf16.mxu0 0
  %2549 = vmatmul.mubr.bf16.gmra.mrb[0].mxu0 %v2408
  %v2550 = vpop.f32.mrb[0].mxu0
  %v2551 = vadd.f32 0.0, %v2550
  %v2552 = vpop.f32.mrb[0].mxu0
  %v2553 = vadd.f32 0.0, %v2552
  %v2554 = vpop.f32.mrb[0].mxu0
  %v2555 = vpop.f32.mrb[0].mxu0
  %2556 = vdwg.mxu0
  %2557 = vmatprep.subr.bf16.mxu0 %v2432
  %2558 = vmatpush1.bf16.msra.mxu0 %v2429
  %2559 = vmatprep.subr.bf16.mxu0 0
  %2560 = vmatpush1.bf16.msra.mxu0 0
  %2561 = vmatprep.subr.bf16.mxu0 0
  %2562 = vmatpush1.bf16.msra.mxu0 0
  %2563 = vmatprep.subr.bf16.mxu0 0
  %2564 = vmatpush1.bf16.msra.mxu0 0
  %2565 = vmatprep.subr.bf16.mxu0 0
  %2566 = vmatpush1.bf16.msra.mxu0 0
  %2567 = vmatprep.subr.bf16.mxu0 0
  %2568 = vmatpush1.bf16.msra.mxu0 0
  %2569 = vmatprep.subr.bf16.mxu0 0
  %2570 = vmatpush1.bf16.msra.mxu0 0
  %2571 = vmatprep.subr.bf16.mxu0 0
  %2572 = vmatpush1.bf16.msra.mxu0 0
  %2573 = vmatprep.subr.bf16.mxu0 0
  %2574 = vmatpush1.bf16.msra.mxu0 0
  %2575 = vmatprep.subr.bf16.mxu0 0
  %2576 = vmatpush1.bf16.msra.mxu0 0
  %2577 = vmatprep.subr.bf16.mxu0 0
  %2578 = vmatpush1.bf16.msra.mxu0 0
  %2579 = vmatprep.subr.bf16.mxu0 0
  %2580 = vmatpush1.bf16.msra.mxu0 0
  %2581 = vmatprep.subr.bf16.mxu0 0
  %2582 = vmatpush1.bf16.msra.mxu0 0
  %2583 = vmatprep.subr.bf16.mxu0 0
  %2584 = vmatpush1.bf16.msra.mxu0 0
  %2585 = vmatprep.subr.bf16.mxu0 0
  %2586 = vmatpush1.bf16.msra.mxu0 0
  %2587 = vmatprep.subr.bf16.mxu0 0
  %2588 = vmatpush1.bf16.msra.mxu0 0
  %2589 = vmatprep.mubr.bf16.mxu0 0
  %2590 = vmatmul.mubr.bf16.gmra.mrb[0].mxu0 %v2408
  %v2591 = vpop.f32.mrb[0].mxu0
  %v2592 = vadd.f32 0.0, %v2591
  %v2593 = vpop.f32.mrb[0].mxu0
  %v2594 = vadd.f32 0.0, %v2593
  %v2595 = vpop.f32.mrb[0].mxu0
  %v2596 = vpop.f32.mrb[0].mxu0
  %2597 = vdwg.mxu0
  %v2598 = vadd.f32 %v2372, %v2469
  %v2599 = vadd.f32 %v2373, %v2471
  %v2600 = vadd.f32 %v2374, %v2510
  %v2601 = vadd.f32 %v2375, %v2512
  %v2602 = vadd.f32 %v2376, %v2551
  %v2603 = vadd.f32 %v2377, %v2553
  %v2604 = vadd.f32 %v2378, %v2592
  %v2605 = vadd.f32 %v2379, %v2594
  %2606 = vrot.lane.b32.xlu0 %v125, 9
  %v2607 = vpop.permute.xlu0 %2606
  %2608 = vrot.lane.b32.xlu0 %v126, 9
  %v2609 = vpop.permute.xlu0 %2608
  %2610 = vrot.lane.b32.xlu0 %v127, 9
  %v2611 = vpop.permute.xlu0 %2610
  %2612 = vrot.lane.b32.xlu0 %v128, 9
  %v2613 = vpop.permute.xlu0 %2612
  %2614 = vrot.lane.b32.xlu0 %v129, 9
  %v2615 = vpop.permute.xlu0 %2614
  %2616 = vrot.lane.b32.xlu0 %v130, 9
  %v2617 = vpop.permute.xlu0 %2616
  %2618 = vrot.lane.b32.xlu0 %v131, 9
  %v2619 = vpop.permute.xlu0 %2618
  %2620 = vrot.lane.b32.xlu0 %v132, 9
  %v2621 = vpop.permute.xlu0 %2620
  %2622 = vrot.lane.b32.xlu0 %v133, 9
  %v2623 = vpop.permute.xlu0 %2622
  %vm2624 = vcmask 72704
  %v2625 = vsel %vm2624, %v2607, %v2609
  %v2626 = vsel %vm2624, %v2609, %v2611
  %v2627 = vsel %vm2624, %v2611, %v2613
  %v2628 = vsel %vm2624, %v2613, %v2615
  %v2629 = vsel %vm2624, %v2615, %v2617
  %v2630 = vsel %vm2624, %v2617, %v2619
  %v2631 = vsel %vm2624, %v2619, %v2621
  %v2632 = vsel %vm2624, %v2621, %v2623
  %v2634 = vsel %vm161, %v90, 0
  %v2637 = vsel %vm165, %v2625, 0
  %v2640 = vsel %vm165, %v2626, 0
  %v2643 = vsel %vm165, %v2627, 0
  %v2646 = vsel %vm165, %v2628, 0
  %v2649 = vsel %vm165, %v2629, 0
  %v2652 = vsel %vm165, %v2630, 0
  %v2655 = vsel %vm165, %v2631, 0
  %v2658 = vsel %vm165, %v2632, 0
  %2660 = vmatprep.subr.bf16.mxu0 %v2640
  %2661 = vmatpush1.bf16.msra.mxu0 %v2637
  %2662 = vmatprep.subr.bf16.mxu0 0
  %2663 = vmatpush1.bf16.msra.mxu0 0
  %2664 = vmatprep.subr.bf16.mxu0 0
  %2665 = vmatpush1.bf16.msra.mxu0 0
  %2666 = vmatprep.subr.bf16.mxu0 0
  %2667 = vmatpush1.bf16.msra.mxu0 0
  %2668 = vmatprep.subr.bf16.mxu0 0
  %2669 = vmatpush1.bf16.msra.mxu0 0
  %2670 = vmatprep.subr.bf16.mxu0 0
  %2671 = vmatpush1.bf16.msra.mxu0 0
  %2672 = vmatprep.subr.bf16.mxu0 0
  %2673 = vmatpush1.bf16.msra.mxu0 0
  %2674 = vmatprep.subr.bf16.mxu0 0
  %2675 = vmatpush1.bf16.msra.mxu0 0
  %2676 = vmatprep.subr.bf16.mxu0 0
  %2677 = vmatpush1.bf16.msra.mxu0 0
  %2678 = vmatprep.subr.bf16.mxu0 0
  %2679 = vmatpush1.bf16.msra.mxu0 0
  %2680 = vmatprep.subr.bf16.mxu0 0
  %2681 = vmatpush1.bf16.msra.mxu0 0
  %2682 = vmatprep.subr.bf16.mxu0 0
  %2683 = vmatpush1.bf16.msra.mxu0 0
  %2684 = vmatprep.subr.bf16.mxu0 0
  %2685 = vmatpush1.bf16.msra.mxu0 0
  %2686 = vmatprep.subr.bf16.mxu0 0
  %2687 = vmatpush1.bf16.msra.mxu0 0
  %2688 = vmatprep.subr.bf16.mxu0 0
  %2689 = vmatpush1.bf16.msra.mxu0 0
  %2690 = vmatprep.subr.bf16.mxu0 0
  %2691 = vmatpush1.bf16.msra.mxu0 0
  %2692 = vmatprep.mubr.bf16.mxu0 0
  %2693 = vmatmul.mubr.bf16.gmra.mrb[0].mxu0 %v2634
  %v2694 = vpop.f32.mrb[0].mxu0
  %v2695 = vadd.f32 0.0, %v2694
  %v2696 = vpop.f32.mrb[0].mxu0
  %v2697 = vadd.f32 0.0, %v2696
  %v2698 = vpop.f32.mrb[0].mxu0
  %v2699 = vpop.f32.mrb[0].mxu0
  %2700 = vdwg.mxu0
  %2701 = vmatprep.subr.bf16.mxu0 %v2646
  %2702 = vmatpush1.bf16.msra.mxu0 %v2643
  %2703 = vmatprep.subr.bf16.mxu0 0
  %2704 = vmatpush1.bf16.msra.mxu0 0
  %2705 = vmatprep.subr.bf16.mxu0 0
  %2706 = vmatpush1.bf16.msra.mxu0 0
  %2707 = vmatprep.subr.bf16.mxu0 0
  %2708 = vmatpush1.bf16.msra.mxu0 0
  %2709 = vmatprep.subr.bf16.mxu0 0
  %2710 = vmatpush1.bf16.msra.mxu0 0
  %2711 = vmatprep.subr.bf16.mxu0 0
  %2712 = vmatpush1.bf16.msra.mxu0 0
  %2713 = vmatprep.subr.bf16.mxu0 0
  %2714 = vmatpush1.bf16.msra.mxu0 0
  %2715 = vmatprep.subr.bf16.mxu0 0
  %2716 = vmatpush1.bf16.msra.mxu0 0
  %2717 = vmatprep.subr.bf16.mxu0 0
  %2718 = vmatpush1.bf16.msra.mxu0 0
  %2719 = vmatprep.subr.bf16.mxu0 0
  %2720 = vmatpush1.bf16.msra.mxu0 0
  %2721 = vmatprep.subr.bf16.mxu0 0
  %2722 = vmatpush1.bf16.msra.mxu0 0
  %2723 = vmatprep.subr.bf16.mxu0 0
  %2724 = vmatpush1.bf16.msra.mxu0 0
  %2725 = vmatprep.subr.bf16.mxu0 0
  %2726 = vmatpush1.bf16.msra.mxu0 0
  %2727 = vmatprep.subr.bf16.mxu0 0
  %2728 = vmatpush1.bf16.msra.mxu0 0
  %2729 = vmatprep.subr.bf16.mxu0 0
  %2730 = vmatpush1.bf16.msra.mxu0 0
  %2731 = vmatprep.subr.bf16.mxu0 0
  %2732 = vmatpush1.bf16.msra.mxu0 0
  %2733 = vmatprep.mubr.bf16.mxu0 0
  %2734 = vmatmul.mubr.bf16.gmra.mrb[0].mxu0 %v2634
  %v2735 = vpop.f32.mrb[0].mxu0
  %v2736 = vadd.f32 0.0, %v2735
  %v2737 = vpop.f32.mrb[0].mxu0
  %v2738 = vadd.f32 0.0, %v2737
  %v2739 = vpop.f32.mrb[0].mxu0
  %v2740 = vpop.f32.mrb[0].mxu0
  %2741 = vdwg.mxu0
  %2742 = vmatprep.subr.bf16.mxu0 %v2652
  %2743 = vmatpush1.bf16.msra.mxu0 %v2649
  %2744 = vmatprep.subr.bf16.mxu0 0
  %2745 = vmatpush1.bf16.msra.mxu0 0
  %2746 = vmatprep.subr.bf16.mxu0 0
  %2747 = vmatpush1.bf16.msra.mxu0 0
  %2748 = vmatprep.subr.bf16.mxu0 0
  %2749 = vmatpush1.bf16.msra.mxu0 0
  %2750 = vmatprep.subr.bf16.mxu0 0
  %2751 = vmatpush1.bf16.msra.mxu0 0
  %2752 = vmatprep.subr.bf16.mxu0 0
  %2753 = vmatpush1.bf16.msra.mxu0 0
  %2754 = vmatprep.subr.bf16.mxu0 0
  %2755 = vmatpush1.bf16.msra.mxu0 0
  %2756 = vmatprep.subr.bf16.mxu0 0
  %2757 = vmatpush1.bf16.msra.mxu0 0
  %2758 = vmatprep.subr.bf16.mxu0 0
  %2759 = vmatpush1.bf16.msra.mxu0 0
  %2760 = vmatprep.subr.bf16.mxu0 0
  %2761 = vmatpush1.bf16.msra.mxu0 0
  %2762 = vmatprep.subr.bf16.mxu0 0
  %2763 = vmatpush1.bf16.msra.mxu0 0
  %2764 = vmatprep.subr.bf16.mxu0 0
  %2765 = vmatpush1.bf16.msra.mxu0 0
  %2766 = vmatprep.subr.bf16.mxu0 0
  %2767 = vmatpush1.bf16.msra.mxu0 0
  %2768 = vmatprep.subr.bf16.mxu0 0
  %2769 = vmatpush1.bf16.msra.mxu0 0
  %2770 = vmatprep.subr.bf16.mxu0 0
  %2771 = vmatpush1.bf16.msra.mxu0 0
  %2772 = vmatprep.subr.bf16.mxu0 0
  %2773 = vmatpush1.bf16.msra.mxu0 0
  %2774 = vmatprep.mubr.bf16.mxu0 0
  %2775 = vmatmul.mubr.bf16.gmra.mrb[0].mxu0 %v2634
  %v2776 = vpop.f32.mrb[0].mxu0
  %v2777 = vadd.f32 0.0, %v2776
  %v2778 = vpop.f32.mrb[0].mxu0
  %v2779 = vadd.f32 0.0, %v2778
  %v2780 = vpop.f32.mrb[0].mxu0
  %v2781 = vpop.f32.mrb[0].mxu0
  %2782 = vdwg.mxu0
  %2783 = vmatprep.subr.bf16.mxu0 %v2658
  %2784 = vmatpush1.bf16.msra.mxu0 %v2655
  %2785 = vmatprep.subr.bf16.mxu0 0
  %2786 = vmatpush1.bf16.msra.mxu0 0
  %2787 = vmatprep.subr.bf16.mxu0 0
  %2788 = vmatpush1.bf16.msra.mxu0 0
  %2789 = vmatprep.subr.bf16.mxu0 0
  %2790 = vmatpush1.bf16.msra.mxu0 0
  %2791 = vmatprep.subr.bf16.mxu0 0
  %2792 = vmatpush1.bf16.msra.mxu0 0
  %2793 = vmatprep.subr.bf16.mxu0 0
  %2794 = vmatpush1.bf16.msra.mxu0 0
  %2795 = vmatprep.subr.bf16.mxu0 0
  %2796 = vmatpush1.bf16.msra.mxu0 0
  %2797 = vmatprep.subr.bf16.mxu0 0
  %2798 = vmatpush1.bf16.msra.mxu0 0
  %2799 = vmatprep.subr.bf16.mxu0 0
  %2800 = vmatpush1.bf16.msra.mxu0 0
  %2801 = vmatprep.subr.bf16.mxu0 0
  %2802 = vmatpush1.bf16.msra.mxu0 0
  %2803 = vmatprep.subr.bf16.mxu0 0
  %2804 = vmatpush1.bf16.msra.mxu0 0
  %2805 = vmatprep.subr.bf16.mxu0 0
  %2806 = vmatpush1.bf16.msra.mxu0 0
  %2807 = vmatprep.subr.bf16.mxu0 0
  %2808 = vmatpush1.bf16.msra.mxu0 0
  %2809 = vmatprep.subr.bf16.mxu0 0
  %2810 = vmatpush1.bf16.msra.mxu0 0
  %2811 = vmatprep.subr.bf16.mxu0 0
  %2812 = vmatpush1.bf16.msra.mxu0 0
  %2813 = vmatprep.subr.bf16.mxu0 0
  %2814 = vmatpush1.bf16.msra.mxu0 0
  %2815 = vmatprep.mubr.bf16.mxu0 0
  %2816 = vmatmul.mubr.bf16.gmra.mrb[0].mxu0 %v2634
  %v2817 = vpop.f32.mrb[0].mxu0
  %v2818 = vadd.f32 0.0, %v2817
  %v2819 = vpop.f32.mrb[0].mxu0
  %v2820 = vadd.f32 0.0, %v2819
  %v2821 = vpop.f32.mrb[0].mxu0
  %v2822 = vpop.f32.mrb[0].mxu0
  %2823 = vdwg.mxu0
  %v2824 = vadd.f32 %v2598, %v2695
  %v2825 = vadd.f32 %v2599, %v2697
  %v2826 = vadd.f32 %v2600, %v2736
  %v2827 = vadd.f32 %v2601, %v2738
  %v2828 = vadd.f32 %v2602, %v2777
  %v2829 = vadd.f32 %v2603, %v2779
  %v2830 = vadd.f32 %v2604, %v2818
  %v2831 = vadd.f32 %v2605, %v2820
  %2832 = vrot.lane.b32.xlu0 %v125, 1
  %v2833 = vpop.permute.xlu0 %2832
  %2834 = vrot.lane.b32.xlu0 %v126, 1
  %v2835 = vpop.permute.xlu0 %2834
  %2836 = vrot.lane.b32.xlu0 %v127, 1
  %v2837 = vpop.permute.xlu0 %2836
  %2838 = vrot.lane.b32.xlu0 %v128, 1
  %v2839 = vpop.permute.xlu0 %2838
  %2840 = vrot.lane.b32.xlu0 %v129, 1
  %v2841 = vpop.permute.xlu0 %2840
  %2842 = vrot.lane.b32.xlu0 %v130, 1
  %v2843 = vpop.permute.xlu0 %2842
  %2844 = vrot.lane.b32.xlu0 %v131, 1
  %v2845 = vpop.permute.xlu0 %2844
  %2846 = vrot.lane.b32.xlu0 %v132, 1
  %v2847 = vpop.permute.xlu0 %2846
  %2848 = vrot.lane.b32.xlu0 %v133, 1
  %v2849 = vpop.permute.xlu0 %2848
  %vm2850 = vcmask 7168
  %v2851 = vsel %vm2850, %v2833, %v2835
  %v2852 = vsel %vm2850, %v2835, %v2837
  %v2853 = vsel %vm2850, %v2837, %v2839
  %v2854 = vsel %vm2850, %v2839, %v2841
  %v2855 = vsel %vm2850, %v2841, %v2843
  %v2856 = vsel %vm2850, %v2843, %v2845
  %v2857 = vsel %vm2850, %v2845, %v2847
  %v2858 = vsel %vm2850, %v2847, %v2849
  %v2860 = vsel %vm161, %v91, 0
  %v2863 = vsel %vm165, %v2851, 0
  %v2866 = vsel %vm165, %v2852, 0
  %v2869 = vsel %vm165, %v2853, 0
  %v2872 = vsel %vm165, %v2854, 0
  %v2875 = vsel %vm165, %v2855, 0
  %v2878 = vsel %vm165, %v2856, 0
  %v2881 = vsel %vm165, %v2857, 0
  %v2884 = vsel %vm165, %v2858, 0
  %2886 = vmatprep.subr.bf16.mxu0 %v2866
  %2887 = vmatpush1.bf16.msra.mxu0 %v2863
  %2888 = vmatprep.subr.bf16.mxu0 0
  %2889 = vmatpush1.bf16.msra.mxu0 0
  %2890 = vmatprep.subr.bf16.mxu0 0
  %2891 = vmatpush1.bf16.msra.mxu0 0
  %2892 = vmatprep.subr.bf16.mxu0 0
  %2893 = vmatpush1.bf16.msra.mxu0 0
  %2894 = vmatprep.subr.bf16.mxu0 0
  %2895 = vmatpush1.bf16.msra.mxu0 0
  %2896 = vmatprep.subr.bf16.mxu0 0
  %2897 = vmatpush1.bf16.msra.mxu0 0
  %2898 = vmatprep.subr.bf16.mxu0 0
  %2899 = vmatpush1.bf16.msra.mxu0 0
  %2900 = vmatprep.subr.bf16.mxu0 0
  %2901 = vmatpush1.bf16.msra.mxu0 0
  %2902 = vmatprep.subr.bf16.mxu0 0
  %2903 = vmatpush1.bf16.msra.mxu0 0
  %2904 = vmatprep.subr.bf16.mxu0 0
  %2905 = vmatpush1.bf16.msra.mxu0 0
  %2906 = vmatprep.subr.bf16.mxu0 0
  %2907 = vmatpush1.bf16.msra.mxu0 0
  %2908 = vmatprep.subr.bf16.mxu0 0
  %2909 = vmatpush1.bf16.msra.mxu0 0
  %2910 = vmatprep.subr.bf16.mxu0 0
  %2911 = vmatpush1.bf16.msra.mxu0 0
  %2912 = vmatprep.subr.bf16.mxu0 0
  %2913 = vmatpush1.bf16.msra.mxu0 0
  %2914 = vmatprep.subr.bf16.mxu0 0
  %2915 = vmatpush1.bf16.msra.mxu0 0
  %2916 = vmatprep.subr.bf16.mxu0 0
  %2917 = vmatpush1.bf16.msra.mxu0 0
  %2918 = vmatprep.mubr.bf16.mxu0 0
  %2919 = vmatmul.mubr.bf16.gmra.mrb[0].mxu0 %v2860
  %v2920 = vpop.f32.mrb[0].mxu0
  %v2921 = vadd.f32 0.0, %v2920
  %v2922 = vpop.f32.mrb[0].mxu0
  %v2923 = vadd.f32 0.0, %v2922
  %v2924 = vpop.f32.mrb[0].mxu0
  %v2925 = vpop.f32.mrb[0].mxu0
  %2926 = vdwg.mxu0
  %2927 = vmatprep.subr.bf16.mxu0 %v2872
  %2928 = vmatpush1.bf16.msra.mxu0 %v2869
  %2929 = vmatprep.subr.bf16.mxu0 0
  %2930 = vmatpush1.bf16.msra.mxu0 0
  %2931 = vmatprep.subr.bf16.mxu0 0
  %2932 = vmatpush1.bf16.msra.mxu0 0
  %2933 = vmatprep.subr.bf16.mxu0 0
  %2934 = vmatpush1.bf16.msra.mxu0 0
  %2935 = vmatprep.subr.bf16.mxu0 0
  %2936 = vmatpush1.bf16.msra.mxu0 0
  %2937 = vmatprep.subr.bf16.mxu0 0
  %2938 = vmatpush1.bf16.msra.mxu0 0
  %2939 = vmatprep.subr.bf16.mxu0 0
  %2940 = vmatpush1.bf16.msra.mxu0 0
  %2941 = vmatprep.subr.bf16.mxu0 0
  %2942 = vmatpush1.bf16.msra.mxu0 0
  %2943 = vmatprep.subr.bf16.mxu0 0
  %2944 = vmatpush1.bf16.msra.mxu0 0
  %2945 = vmatprep.subr.bf16.mxu0 0
  %2946 = vmatpush1.bf16.msra.mxu0 0
  %2947 = vmatprep.subr.bf16.mxu0 0
  %2948 = vmatpush1.bf16.msra.mxu0 0
  %2949 = vmatprep.subr.bf16.mxu0 0
  %2950 = vmatpush1.bf16.msra.mxu0 0
  %2951 = vmatprep.subr.bf16.mxu0 0
  %2952 = vmatpush1.bf16.msra.mxu0 0
  %2953 = vmatprep.subr.bf16.mxu0 0
  %2954 = vmatpush1.bf16.msra.mxu0 0
  %2955 = vmatprep.subr.bf16.mxu0 0
  %2956 = vmatpush1.bf16.msra.mxu0 0
  %2957 = vmatprep.subr.bf16.mxu0 0
  %2958 = vmatpush1.bf16.msra.mxu0 0
  %2959 = vmatprep.mubr.bf16.mxu0 0
  %2960 = vmatmul.mubr.bf16.gmra.mrb[0].mxu0 %v2860
  %v2961 = vpop.f32.mrb[0].mxu0
  %v2962 = vadd.f32 0.0, %v2961
  %v2963 = vpop.f32.mrb[0].mxu0
  %v2964 = vadd.f32 0.0, %v2963
  %v2965 = vpop.f32.mrb[0].mxu0
  %v2966 = vpop.f32.mrb[0].mxu0
  %2967 = vdwg.mxu0
  %2968 = vmatprep.subr.bf16.mxu0 %v2878
  %2969 = vmatpush1.bf16.msra.mxu0 %v2875
  %2970 = vmatprep.subr.bf16.mxu0 0
  %2971 = vmatpush1.bf16.msra.mxu0 0
  %2972 = vmatprep.subr.bf16.mxu0 0
  %2973 = vmatpush1.bf16.msra.mxu0 0
  %2974 = vmatprep.subr.bf16.mxu0 0
  %2975 = vmatpush1.bf16.msra.mxu0 0
  %2976 = vmatprep.subr.bf16.mxu0 0
  %2977 = vmatpush1.bf16.msra.mxu0 0
  %2978 = vmatprep.subr.bf16.mxu0 0
  %2979 = vmatpush1.bf16.msra.mxu0 0
  %2980 = vmatprep.subr.bf16.mxu0 0
  %2981 = vmatpush1.bf16.msra.mxu0 0
  %2982 = vmatprep.subr.bf16.mxu0 0
  %2983 = vmatpush1.bf16.msra.mxu0 0
  %2984 = vmatprep.subr.bf16.mxu0 0
  %2985 = vmatpush1.bf16.msra.mxu0 0
  %2986 = vmatprep.subr.bf16.mxu0 0
  %2987 = vmatpush1.bf16.msra.mxu0 0
  %2988 = vmatprep.subr.bf16.mxu0 0
  %2989 = vmatpush1.bf16.msra.mxu0 0
  %2990 = vmatprep.subr.bf16.mxu0 0
  %2991 = vmatpush1.bf16.msra.mxu0 0
  %2992 = vmatprep.subr.bf16.mxu0 0
  %2993 = vmatpush1.bf16.msra.mxu0 0
  %2994 = vmatprep.subr.bf16.mxu0 0
  %2995 = vmatpush1.bf16.msra.mxu0 0
  %2996 = vmatprep.subr.bf16.mxu0 0
  %2997 = vmatpush1.bf16.msra.mxu0 0
  %2998 = vmatprep.subr.bf16.mxu0 0
  %2999 = vmatpush1.bf16.msra.mxu0 0
  %3000 = vmatprep.mubr.bf16.mxu0 0
  %3001 = vmatmul.mubr.bf16.gmra.mrb[0].mxu0 %v2860
  %v3002 = vpop.f32.mrb[0].mxu0
  %v3003 = vadd.f32 0.0, %v3002
  %v3004 = vpop.f32.mrb[0].mxu0
  %v3005 = vadd.f32 0.0, %v3004
  %v3006 = vpop.f32.mrb[0].mxu0
  %v3007 = vpop.f32.mrb[0].mxu0
  %3008 = vdwg.mxu0
  %3009 = vmatprep.subr.bf16.mxu0 %v2884
  %3010 = vmatpush1.bf16.msra.mxu0 %v2881
  %3011 = vmatprep.subr.bf16.mxu0 0
  %3012 = vmatpush1.bf16.msra.mxu0 0
  %3013 = vmatprep.subr.bf16.mxu0 0
  %3014 = vmatpush1.bf16.msra.mxu0 0
  %3015 = vmatprep.subr.bf16.mxu0 0
  %3016 = vmatpush1.bf16.msra.mxu0 0
  %3017 = vmatprep.subr.bf16.mxu0 0
  %3018 = vmatpush1.bf16.msra.mxu0 0
  %3019 = vmatprep.subr.bf16.mxu0 0
  %3020 = vmatpush1.bf16.msra.mxu0 0
  %3021 = vmatprep.subr.bf16.mxu0 0
  %3022 = vmatpush1.bf16.msra.mxu0 0
  %3023 = vmatprep.subr.bf16.mxu0 0
  %3024 = vmatpush1.bf16.msra.mxu0 0
  %3025 = vmatprep.subr.bf16.mxu0 0
  %3026 = vmatpush1.bf16.msra.mxu0 0
  %3027 = vmatprep.subr.bf16.mxu0 0
  %3028 = vmatpush1.bf16.msra.mxu0 0
  %3029 = vmatprep.subr.bf16.mxu0 0
  %3030 = vmatpush1.bf16.msra.mxu0 0
  %3031 = vmatprep.subr.bf16.mxu0 0
  %3032 = vmatpush1.bf16.msra.mxu0 0
  %3033 = vmatprep.subr.bf16.mxu0 0
  %3034 = vmatpush1.bf16.msra.mxu0 0
  %3035 = vmatprep.subr.bf16.mxu0 0
  %3036 = vmatpush1.bf16.msra.mxu0 0
  %3037 = vmatprep.subr.bf16.mxu0 0
  %3038 = vmatpush1.bf16.msra.mxu0 0
  %3039 = vmatprep.subr.bf16.mxu0 0
  %3040 = vmatpush1.bf16.msra.mxu0 0
  %3041 = vmatprep.mubr.bf16.mxu0 0
  %3042 = vmatmul.mubr.bf16.gmra.mrb[0].mxu0 %v2860
  %v3043 = vpop.f32.mrb[0].mxu0
  %v3044 = vadd.f32 0.0, %v3043
  %v3045 = vpop.f32.mrb[0].mxu0
  %v3046 = vadd.f32 0.0, %v3045
  %v3047 = vpop.f32.mrb[0].mxu0
  %v3048 = vpop.f32.mrb[0].mxu0
  %3049 = vdwg.mxu0
  %v3050 = vadd.f32 %v2824, %v2921
  %v3051 = vadd.f32 %v2825, %v2923
  %v3052 = vadd.f32 %v2826, %v2962
  %v3053 = vadd.f32 %v2827, %v2964
  %v3054 = vadd.f32 %v2828, %v3003
  %v3055 = vadd.f32 %v2829, %v3005
  %v3056 = vadd.f32 %v2830, %v3044
  %v3057 = vadd.f32 %v2831, %v3046
  %v3058 = vld [vmem:[#allocation2 + $0x4] sm:$0xff]
  %v3059 = vld [vmem:[#allocation2 + $0xc] sm:$0xff]
  %v3060 = vld [vmem:[#allocation2 + $0x14] sm:$0xff]
  %v3061 = vld [vmem:[#allocation2 + $0x1c] sm:$0xff]
  %v3066 = vunpack.c.l.b16 %v3058
  %v3067 = vunpack.c.h.b16 %v3058
  %v3068 = vunpack.c.l.b16 %v3059
  %v3069 = vunpack.c.h.b16 %v3059
  %v3070 = vunpack.c.l.b16 %v3060
  %v3071 = vunpack.c.h.b16 %v3060
  %v3072 = vunpack.c.l.b16 %v3061
  %v3073 = vunpack.c.h.b16 %v3061
  %v3074 = vpack.c.b16 %v3066, %v3066
  %v3075 = vpack.c.b16 %v3067, %v3067
  %v3076 = vpack.c.b16 %v3068, %v3068
  %v3077 = vpack.c.b16 %v3069, %v3069
  %v3078 = vpack.c.b16 %v3070, %v3070
  %v3079 = vpack.c.b16 %v3071, %v3071
  %v3080 = vpack.c.b16 %v3072, %v3072
  %v3081 = vpack.c.b16 %v3073, %v3073
  %v3083 = vsel %vm161, %v92, 0
  %v3086 = vsel %vm165, %v3074, 0
  %v3089 = vsel %vm165, %v3075, 0
  %v3092 = vsel %vm165, %v3076, 0
  %v3095 = vsel %vm165, %v3077, 0
  %v3098 = vsel %vm165, %v3078, 0
  %v3101 = vsel %vm165, %v3079, 0
  %v3104 = vsel %vm165, %v3080, 0
  %v3107 = vsel %vm165, %v3081, 0
  %3109 = vmatprep.subr.bf16.mxu0 %v3089
  %3110 = vmatpush1.bf16.msra.mxu0 %v3086
  %3111 = vmatprep.subr.bf16.mxu0 0
  %3112 = vmatpush1.bf16.msra.mxu0 0
  %3113 = vmatprep.subr.bf16.mxu0 0
  %3114 = vmatpush1.bf16.msra.mxu0 0
  %3115 = vmatprep.subr.bf16.mxu0 0
  %3116 = vmatpush1.bf16.msra.mxu0 0
  %3117 = vmatprep.subr.bf16.mxu0 0
  %3118 = vmatpush1.bf16.msra.mxu0 0
  %3119 = vmatprep.subr.bf16.mxu0 0
  %3120 = vmatpush1.bf16.msra.mxu0 0
  %3121 = vmatprep.subr.bf16.mxu0 0
  %3122 = vmatpush1.bf16.msra.mxu0 0
  %3123 = vmatprep.subr.bf16.mxu0 0
  %3124 = vmatpush1.bf16.msra.mxu0 0
  %3125 = vmatprep.subr.bf16.mxu0 0
  %3126 = vmatpush1.bf16.msra.mxu0 0
  %3127 = vmatprep.subr.bf16.mxu0 0
  %3128 = vmatpush1.bf16.msra.mxu0 0
  %3129 = vmatprep.subr.bf16.mxu0 0
  %3130 = vmatpush1.bf16.msra.mxu0 0
  %3131 = vmatprep.subr.bf16.mxu0 0
  %3132 = vmatpush1.bf16.msra.mxu0 0
  %3133 = vmatprep.subr.bf16.mxu0 0
  %3134 = vmatpush1.bf16.msra.mxu0 0
  %3135 = vmatprep.subr.bf16.mxu0 0
  %3136 = vmatpush1.bf16.msra.mxu0 0
  %3137 = vmatprep.subr.bf16.mxu0 0
  %3138 = vmatpush1.bf16.msra.mxu0 0
  %3139 = vmatprep.subr.bf16.mxu0 0
  %3140 = vmatpush1.bf16.msra.mxu0 0
  %3141 = vmatprep.mubr.bf16.mxu0 0
  %3142 = vmatmul.mubr.bf16.gmra.mrb[0].mxu0 %v3083
  %v3143 = vpop.f32.mrb[0].mxu0
  %v3144 = vadd.f32 0.0, %v3143
  %v3145 = vpop.f32.mrb[0].mxu0
  %v3146 = vadd.f32 0.0, %v3145
  %v3147 = vpop.f32.mrb[0].mxu0
  %v3148 = vpop.f32.mrb[0].mxu0
  %3149 = vdwg.mxu0
  %3150 = vmatprep.subr.bf16.mxu0 %v3095
  %3151 = vmatpush1.bf16.msra.mxu0 %v3092
  %3152 = vmatprep.subr.bf16.mxu0 0
  %3153 = vmatpush1.bf16.msra.mxu0 0
  %3154 = vmatprep.subr.bf16.mxu0 0
  %3155 = vmatpush1.bf16.msra.mxu0 0
  %3156 = vmatprep.subr.bf16.mxu0 0
  %3157 = vmatpush1.bf16.msra.mxu0 0
  %3158 = vmatprep.subr.bf16.mxu0 0
  %3159 = vmatpush1.bf16.msra.mxu0 0
  %3160 = vmatprep.subr.bf16.mxu0 0
  %3161 = vmatpush1.bf16.msra.mxu0 0
  %3162 = vmatprep.subr.bf16.mxu0 0
  %3163 = vmatpush1.bf16.msra.mxu0 0
  %3164 = vmatprep.subr.bf16.mxu0 0
  %3165 = vmatpush1.bf16.msra.mxu0 0
  %3166 = vmatprep.subr.bf16.mxu0 0
  %3167 = vmatpush1.bf16.msra.mxu0 0
  %3168 = vmatprep.subr.bf16.mxu0 0
  %3169 = vmatpush1.bf16.msra.mxu0 0
  %3170 = vmatprep.subr.bf16.mxu0 0
  %3171 = vmatpush1.bf16.msra.mxu0 0
  %3172 = vmatprep.subr.bf16.mxu0 0
  %3173 = vmatpush1.bf16.msra.mxu0 0
  %3174 = vmatprep.subr.bf16.mxu0 0
  %3175 = vmatpush1.bf16.msra.mxu0 0
  %3176 = vmatprep.subr.bf16.mxu0 0
  %3177 = vmatpush1.bf16.msra.mxu0 0
  %3178 = vmatprep.subr.bf16.mxu0 0
  %3179 = vmatpush1.bf16.msra.mxu0 0
  %3180 = vmatprep.subr.bf16.mxu0 0
  %3181 = vmatpush1.bf16.msra.mxu0 0
  %3182 = vmatprep.mubr.bf16.mxu0 0
  %3183 = vmatmul.mubr.bf16.gmra.mrb[0].mxu0 %v3083
  %v3184 = vpop.f32.mrb[0].mxu0
  %v3185 = vadd.f32 0.0, %v3184
  %v3186 = vpop.f32.mrb[0].mxu0
  %v3187 = vadd.f32 0.0, %v3186
  %v3188 = vpop.f32.mrb[0].mxu0
  %v3189 = vpop.f32.mrb[0].mxu0
  %3190 = vdwg.mxu0
  %3191 = vmatprep.subr.bf16.mxu0 %v3101
  %3192 = vmatpush1.bf16.msra.mxu0 %v3098
  %3193 = vmatprep.subr.bf16.mxu0 0
  %3194 = vmatpush1.bf16.msra.mxu0 0
  %3195 = vmatprep.subr.bf16.mxu0 0
  %3196 = vmatpush1.bf16.msra.mxu0 0
  %3197 = vmatprep.subr.bf16.mxu0 0
  %3198 = vmatpush1.bf16.msra.mxu0 0
  %3199 = vmatprep.subr.bf16.mxu0 0
  %3200 = vmatpush1.bf16.msra.mxu0 0
  %3201 = vmatprep.subr.bf16.mxu0 0
  %3202 = vmatpush1.bf16.msra.mxu0 0
  %3203 = vmatprep.subr.bf16.mxu0 0
  %3204 = vmatpush1.bf16.msra.mxu0 0
  %3205 = vmatprep.subr.bf16.mxu0 0
  %3206 = vmatpush1.bf16.msra.mxu0 0
  %3207 = vmatprep.subr.bf16.mxu0 0
  %3208 = vmatpush1.bf16.msra.mxu0 0
  %3209 = vmatprep.subr.bf16.mxu0 0
  %3210 = vmatpush1.bf16.msra.mxu0 0
  %3211 = vmatprep.subr.bf16.mxu0 0
  %3212 = vmatpush1.bf16.msra.mxu0 0
  %3213 = vmatprep.subr.bf16.mxu0 0
  %3214 = vmatpush1.bf16.msra.mxu0 0
  %3215 = vmatprep.subr.bf16.mxu0 0
  %3216 = vmatpush1.bf16.msra.mxu0 0
  %3217 = vmatprep.subr.bf16.mxu0 0
  %3218 = vmatpush1.bf16.msra.mxu0 0
  %3219 = vmatprep.subr.bf16.mxu0 0
  %3220 = vmatpush1.bf16.msra.mxu0 0
  %3221 = vmatprep.subr.bf16.mxu0 0
  %3222 = vmatpush1.bf16.msra.mxu0 0
  %3223 = vmatprep.mubr.bf16.mxu0 0
  %3224 = vmatmul.mubr.bf16.gmra.mrb[0].mxu0 %v3083
  %v3225 = vpop.f32.mrb[0].mxu0
  %v3226 = vadd.f32 0.0, %v3225
  %v3227 = vpop.f32.mrb[0].mxu0
  %v3228 = vadd.f32 0.0, %v3227
  %v3229 = vpop.f32.mrb[0].mxu0
  %v3230 = vpop.f32.mrb[0].mxu0
  %3231 = vdwg.mxu0
  %3232 = vmatprep.subr.bf16.mxu0 %v3107
  %3233 = vmatpush1.bf16.msra.mxu0 %v3104
  %3234 = vmatprep.subr.bf16.mxu0 0
  %3235 = vmatpush1.bf16.msra.mxu0 0
  %3236 = vmatprep.subr.bf16.mxu0 0
  %3237 = vmatpush1.bf16.msra.mxu0 0
  %3238 = vmatprep.subr.bf16.mxu0 0
  %3239 = vmatpush1.bf16.msra.mxu0 0
  %3240 = vmatprep.subr.bf16.mxu0 0
  %3241 = vmatpush1.bf16.msra.mxu0 0
  %3242 = vmatprep.subr.bf16.mxu0 0
  %3243 = vmatpush1.bf16.msra.mxu0 0
  %3244 = vmatprep.subr.bf16.mxu0 0
  %3245 = vmatpush1.bf16.msra.mxu0 0
  %3246 = vmatprep.subr.bf16.mxu0 0
  %3247 = vmatpush1.bf16.msra.mxu0 0
  %3248 = vmatprep.subr.bf16.mxu0 0
  %3249 = vmatpush1.bf16.msra.mxu0 0
  %3250 = vmatprep.subr.bf16.mxu0 0
  %3251 = vmatpush1.bf16.msra.mxu0 0
  %3252 = vmatprep.subr.bf16.mxu0 0
  %3253 = vmatpush1.bf16.msra.mxu0 0
  %3254 = vmatprep.subr.bf16.mxu0 0
  %3255 = vmatpush1.bf16.msra.mxu0 0
  %3256 = vmatprep.subr.bf16.mxu0 0
  %3257 = vmatpush1.bf16.msra.mxu0 0
  %3258 = vmatprep.subr.bf16.mxu0 0
  %3259 = vmatpush1.bf16.msra.mxu0 0
  %3260 = vmatprep.subr.bf16.mxu0 0
  %3261 = vmatpush1.bf16.msra.mxu0 0
  %3262 = vmatprep.subr.bf16.mxu0 0
  %3263 = vmatpush1.bf16.msra.mxu0 0
  %3264 = vmatprep.mubr.bf16.mxu0 0
  %3265 = vmatmul.mubr.bf16.gmra.mrb[0].mxu0 %v3083
  %v3266 = vpop.f32.mrb[0].mxu0
  %v3267 = vadd.f32 0.0, %v3266
  %v3268 = vpop.f32.mrb[0].mxu0
  %v3269 = vadd.f32 0.0, %v3268
  %v3270 = vpop.f32.mrb[0].mxu0
  %v3271 = vpop.f32.mrb[0].mxu0
  %3272 = vdwg.mxu0
  %v3273 = vadd.f32 %v3050, %v3144
  %v3274 = vadd.f32 %v3051, %v3146
  %v3275 = vadd.f32 %v3052, %v3185
  %v3276 = vadd.f32 %v3053, %v3187
  %v3277 = vadd.f32 %v3054, %v3226
  %v3278 = vadd.f32 %v3055, %v3228
  %v3279 = vadd.f32 %v3056, %v3267
  %v3280 = vadd.f32 %v3057, %v3269
  %v3281 = vld [vmem:[#allocation2 + $0x4] sm:$0xff]
  %v3282 = vld [vmem:[#allocation2 + $0xc] sm:$0xff]
  %v3283 = vld [vmem:[#allocation2 + $0x14] sm:$0xff]
  %v3284 = vld [vmem:[#allocation2 + $0x1c] sm:$0xff]
  %v3285 = vld [vmem:[#allocation2 + $0x24] sm:$0xf]
  %v3291 = vunpack.c.l.b16 %v3281
  %v3292 = vunpack.c.h.b16 %v3281
  %v3293 = vunpack.c.l.b16 %v3282
  %v3294 = vunpack.c.h.b16 %v3282
  %v3295 = vunpack.c.l.b16 %v3283
  %v3296 = vunpack.c.h.b16 %v3283
  %v3297 = vunpack.c.l.b16 %v3284
  %v3298 = vunpack.c.h.b16 %v3284
  %v3299 = vunpack.c.l.b16 %v3285
  %v3300 = vpack.c.b16 %v3291, %v3291
  %v3301 = vpack.c.b16 %v3292, %v3292
  %v3302 = vpack.c.b16 %v3293, %v3293
  %v3303 = vpack.c.b16 %v3294, %v3294
  %v3304 = vpack.c.b16 %v3295, %v3295
  %v3305 = vpack.c.b16 %v3296, %v3296
  %v3306 = vpack.c.b16 %v3297, %v3297
  %v3307 = vpack.c.b16 %v3298, %v3298
  %v3308 = vpack.c.b16 %v3299, %v3299
  %3309 = vrot.lane.b32.xlu0 %v3300, 127
  %v3310 = vpop.permute.xlu0 %3309
  %3311 = vrot.lane.b32.xlu0 %v3301, 127
  %v3312 = vpop.permute.xlu0 %3311
  %3313 = vrot.lane.b32.xlu0 %v3302, 127
  %v3314 = vpop.permute.xlu0 %3313
  %3315 = vrot.lane.b32.xlu0 %v3303, 127
  %v3316 = vpop.permute.xlu0 %3315
  %3317 = vrot.lane.b32.xlu0 %v3304, 127
  %v3318 = vpop.permute.xlu0 %3317
  %3319 = vrot.lane.b32.xlu0 %v3305, 127
  %v3320 = vpop.permute.xlu0 %3319
  %3321 = vrot.lane.b32.xlu0 %v3306, 127
  %v3322 = vpop.permute.xlu0 %3321
  %3323 = vrot.lane.b32.xlu0 %v3307, 127
  %v3324 = vpop.permute.xlu0 %3323
  %3325 = vrot.lane.b32.xlu0 %v3308, 127
  %v3326 = vpop.permute.xlu0 %3325
  %vm3327 = vcmask 1039360
  %v3328 = vsel %vm3327, %v3310, %v3312
  %v3329 = vsel %vm3327, %v3312, %v3314
  %v3330 = vsel %vm3327, %v3314, %v3316
  %v3331 = vsel %vm3327, %v3316, %v3318
  %v3332 = vsel %vm3327, %v3318, %v3320
  %v3333 = vsel %vm3327, %v3320, %v3322
  %v3334 = vsel %vm3327, %v3322, %v3324
  %v3335 = vsel %vm3327, %v3324, %v3326
  %v3337 = vsel %vm161, %v93, 0
  %v3340 = vsel %vm165, %v3328, 0
  %v3343 = vsel %vm165, %v3329, 0
  %v3346 = vsel %vm165, %v3330, 0
  %v3349 = vsel %vm165, %v3331, 0
  %v3352 = vsel %vm165, %v3332, 0
  %v3355 = vsel %vm165, %v3333, 0
  %v3358 = vsel %vm165, %v3334, 0
  %v3361 = vsel %vm165, %v3335, 0
  %3363 = vmatprep.subr.bf16.mxu0 %v3343
  %3364 = vmatpush1.bf16.msra.mxu0 %v3340
  %3365 = vmatprep.subr.bf16.mxu0 0
  %3366 = vmatpush1.bf16.msra.mxu0 0
  %3367 = vmatprep.subr.bf16.mxu0 0
  %3368 = vmatpush1.bf16.msra.mxu0 0
  %3369 = vmatprep.subr.bf16.mxu0 0
  %3370 = vmatpush1.bf16.msra.mxu0 0
  %3371 = vmatprep.subr.bf16.mxu0 0
  %3372 = vmatpush1.bf16.msra.mxu0 0
  %3373 = vmatprep.subr.bf16.mxu0 0
  %3374 = vmatpush1.bf16.msra.mxu0 0
  %3375 = vmatprep.subr.bf16.mxu0 0
  %3376 = vmatpush1.bf16.msra.mxu0 0
  %3377 = vmatprep.subr.bf16.mxu0 0
  %3378 = vmatpush1.bf16.msra.mxu0 0
  %3379 = vmatprep.subr.bf16.mxu0 0
  %3380 = vmatpush1.bf16.msra.mxu0 0
  %3381 = vmatprep.subr.bf16.mxu0 0
  %3382 = vmatpush1.bf16.msra.mxu0 0
  %3383 = vmatprep.subr.bf16.mxu0 0
  %3384 = vmatpush1.bf16.msra.mxu0 0
  %3385 = vmatprep.subr.bf16.mxu0 0
  %3386 = vmatpush1.bf16.msra.mxu0 0
  %3387 = vmatprep.subr.bf16.mxu0 0
  %3388 = vmatpush1.bf16.msra.mxu0 0
  %3389 = vmatprep.subr.bf16.mxu0 0
  %3390 = vmatpush1.bf16.msra.mxu0 0
  %3391 = vmatprep.subr.bf16.mxu0 0
  %3392 = vmatpush1.bf16.msra.mxu0 0
  %3393 = vmatprep.subr.bf16.mxu0 0
  %3394 = vmatpush1.bf16.msra.mxu0 0
  %3395 = vmatprep.mubr.bf16.mxu0 0
  %3396 = vmatmul.mubr.bf16.gmra.mrb[0].mxu0 %v3337
  %v3397 = vpop.f32.mrb[0].mxu0
  %v3398 = vadd.f32 0.0, %v3397
  %v3399 = vpop.f32.mrb[0].mxu0
  %v3400 = vadd.f32 0.0, %v3399
  %v3401 = vpop.f32.mrb[0].mxu0
  %v3402 = vpop.f32.mrb[0].mxu0
  %3403 = vdwg.mxu0
  %3404 = vmatprep.subr.bf16.mxu0 %v3349
  %3405 = vmatpush1.bf16.msra.mxu0 %v3346
  %3406 = vmatprep.subr.bf16.mxu0 0
  %3407 = vmatpush1.bf16.msra.mxu0 0
  %3408 = vmatprep.subr.bf16.mxu0 0
  %3409 = vmatpush1.bf16.msra.mxu0 0
  %3410 = vmatprep.subr.bf16.mxu0 0
  %3411 = vmatpush1.bf16.msra.mxu0 0
  %3412 = vmatprep.subr.bf16.mxu0 0
  %3413 = vmatpush1.bf16.msra.mxu0 0
  %3414 = vmatprep.subr.bf16.mxu0 0
  %3415 = vmatpush1.bf16.msra.mxu0 0
  %3416 = vmatprep.subr.bf16.mxu0 0
  %3417 = vmatpush1.bf16.msra.mxu0 0
  %3418 = vmatprep.subr.bf16.mxu0 0
  %3419 = vmatpush1.bf16.msra.mxu0 0
  %3420 = vmatprep.subr.bf16.mxu0 0
  %3421 = vmatpush1.bf16.msra.mxu0 0
  %3422 = vmatprep.subr.bf16.mxu0 0
  %3423 = vmatpush1.bf16.msra.mxu0 0
  %3424 = vmatprep.subr.bf16.mxu0 0
  %3425 = vmatpush1.bf16.msra.mxu0 0
  %3426 = vmatprep.subr.bf16.mxu0 0
  %3427 = vmatpush1.bf16.msra.mxu0 0
  %3428 = vmatprep.subr.bf16.mxu0 0
  %3429 = vmatpush1.bf16.msra.mxu0 0
  %3430 = vmatprep.subr.bf16.mxu0 0
  %3431 = vmatpush1.bf16.msra.mxu0 0
  %3432 = vmatprep.subr.bf16.mxu0 0
  %3433 = vmatpush1.bf16.msra.mxu0 0
  %3434 = vmatprep.subr.bf16.mxu0 0
  %3435 = vmatpush1.bf16.msra.mxu0 0
  %3436 = vmatprep.mubr.bf16.mxu0 0
  %3437 = vmatmul.mubr.bf16.gmra.mrb[0].mxu0 %v3337
  %v3438 = vpop.f32.mrb[0].mxu0
  %v3439 = vadd.f32 0.0, %v3438
  %v3440 = vpop.f32.mrb[0].mxu0
  %v3441 = vadd.f32 0.0, %v3440
  %v3442 = vpop.f32.mrb[0].mxu0
  %v3443 = vpop.f32.mrb[0].mxu0
  %3444 = vdwg.mxu0
  %3445 = vmatprep.subr.bf16.mxu0 %v3355
  %3446 = vmatpush1.bf16.msra.mxu0 %v3352
  %3447 = vmatprep.subr.bf16.mxu0 0
  %3448 = vmatpush1.bf16.msra.mxu0 0
  %3449 = vmatprep.subr.bf16.mxu0 0
  %3450 = vmatpush1.bf16.msra.mxu0 0
  %3451 = vmatprep.subr.bf16.mxu0 0
  %3452 = vmatpush1.bf16.msra.mxu0 0
  %3453 = vmatprep.subr.bf16.mxu0 0
  %3454 = vmatpush1.bf16.msra.mxu0 0
  %3455 = vmatprep.subr.bf16.mxu0 0
  %3456 = vmatpush1.bf16.msra.mxu0 0
  %3457 = vmatprep.subr.bf16.mxu0 0
  %3458 = vmatpush1.bf16.msra.mxu0 0
  %3459 = vmatprep.subr.bf16.mxu0 0
  %3460 = vmatpush1.bf16.msra.mxu0 0
  %3461 = vmatprep.subr.bf16.mxu0 0
  %3462 = vmatpush1.bf16.msra.mxu0 0
  %3463 = vmatprep.subr.bf16.mxu0 0
  %3464 = vmatpush1.bf16.msra.mxu0 0
  %3465 = vmatprep.subr.bf16.mxu0 0
  %3466 = vmatpush1.bf16.msra.mxu0 0
  %3467 = vmatprep.subr.bf16.mxu0 0
  %3468 = vmatpush1.bf16.msra.mxu0 0
  %3469 = vmatprep.subr.bf16.mxu0 0
  %3470 = vmatpush1.bf16.msra.mxu0 0
  %3471 = vmatprep.subr.bf16.mxu0 0
  %3472 = vmatpush1.bf16.msra.mxu0 0
  %3473 = vmatprep.subr.bf16.mxu0 0
  %3474 = vmatpush1.bf16.msra.mxu0 0
  %3475 = vmatprep.subr.bf16.mxu0 0
  %3476 = vmatpush1.bf16.msra.mxu0 0
  %3477 = vmatprep.mubr.bf16.mxu0 0
  %3478 = vmatmul.mubr.bf16.gmra.mrb[0].mxu0 %v3337
  %v3479 = vpop.f32.mrb[0].mxu0
  %v3480 = vadd.f32 0.0, %v3479
  %v3481 = vpop.f32.mrb[0].mxu0
  %v3482 = vadd.f32 0.0, %v3481
  %v3483 = vpop.f32.mrb[0].mxu0
  %v3484 = vpop.f32.mrb[0].mxu0
  %3485 = vdwg.mxu0
  %3486 = vmatprep.subr.bf16.mxu0 %v3361
  %3487 = vmatpush1.bf16.msra.mxu0 %v3358
  %3488 = vmatprep.subr.bf16.mxu0 0
  %3489 = vmatpush1.bf16.msra.mxu0 0
  %3490 = vmatprep.subr.bf16.mxu0 0
  %3491 = vmatpush1.bf16.msra.mxu0 0
  %3492 = vmatprep.subr.bf16.mxu0 0
  %3493 = vmatpush1.bf16.msra.mxu0 0
  %3494 = vmatprep.subr.bf16.mxu0 0
  %3495 = vmatpush1.bf16.msra.mxu0 0
  %3496 = vmatprep.subr.bf16.mxu0 0
  %3497 = vmatpush1.bf16.msra.mxu0 0
  %3498 = vmatprep.subr.bf16.mxu0 0
  %3499 = vmatpush1.bf16.msra.mxu0 0
  %3500 = vmatprep.subr.bf16.mxu0 0
  %3501 = vmatpush1.bf16.msra.mxu0 0
  %3502 = vmatprep.subr.bf16.mxu0 0
  %3503 = vmatpush1.bf16.msra.mxu0 0
  %3504 = vmatprep.subr.bf16.mxu0 0
  %3505 = vmatpush1.bf16.msra.mxu0 0
  %3506 = vmatprep.subr.bf16.mxu0 0
  %3507 = vmatpush1.bf16.msra.mxu0 0
  %3508 = vmatprep.subr.bf16.mxu0 0
  %3509 = vmatpush1.bf16.msra.mxu0 0
  %3510 = vmatprep.subr.bf16.mxu0 0
  %3511 = vmatpush1.bf16.msra.mxu0 0
  %3512 = vmatprep.subr.bf16.mxu0 0
  %3513 = vmatpush1.bf16.msra.mxu0 0
  %3514 = vmatprep.subr.bf16.mxu0 0
  %3515 = vmatpush1.bf16.msra.mxu0 0
  %3516 = vmatprep.subr.bf16.mxu0 0
  %3517 = vmatpush1.bf16.msra.mxu0 0
  %3518 = vmatprep.mubr.bf16.mxu0 0
  %3519 = vmatmul.mubr.bf16.gmra.mrb[0].mxu0 %v3337
  %v3520 = vpop.f32.mrb[0].mxu0
  %v3521 = vadd.f32 0.0, %v3520
  %v3522 = vpop.f32.mrb[0].mxu0
  %v3523 = vadd.f32 0.0, %v3522
  %v3524 = vpop.f32.mrb[0].mxu0
  %v3525 = vpop.f32.mrb[0].mxu0
  %3526 = vdwg.mxu0
  %v3527 = vadd.f32 %v3273, %v3398
  %v3528 = vadd.f32 %v3274, %v3400
  %v3529 = vadd.f32 %v3275, %v3439
  %v3530 = vadd.f32 %v3276, %v3441
  %v3531 = vadd.f32 %v3277, %v3480
  %v3532 = vadd.f32 %v3278, %v3482
  %v3533 = vadd.f32 %v3279, %v3521
  %v3534 = vadd.f32 %v3280, %v3523
  %3535 = vrot.lane.b32.xlu0 %v3300, 119
  %v3536 = vpop.permute.xlu0 %3535
  %3537 = vrot.lane.b32.xlu0 %v3301, 119
  %v3538 = vpop.permute.xlu0 %3537
  %3539 = vrot.lane.b32.xlu0 %v3302, 119
  %v3540 = vpop.permute.xlu0 %3539
  %3541 = vrot.lane.b32.xlu0 %v3303, 119
  %v3542 = vpop.permute.xlu0 %3541
  %3543 = vrot.lane.b32.xlu0 %v3304, 119
  %v3544 = vpop.permute.xlu0 %3543
  %3545 = vrot.lane.b32.xlu0 %v3305, 119
  %v3546 = vpop.permute.xlu0 %3545
  %3547 = vrot.lane.b32.xlu0 %v3306, 119
  %v3548 = vpop.permute.xlu0 %3547
  %3549 = vrot.lane.b32.xlu0 %v3307, 119
  %v3550 = vpop.permute.xlu0 %3549
  %3551 = vrot.lane.b32.xlu0 %v3308, 119
  %v3552 = vpop.permute.xlu0 %3551
  %vm3553 = vcmask 973824
  %v3554 = vsel %vm3553, %v3536, %v3538
  %v3555 = vsel %vm3553, %v3538, %v3540
  %v3556 = vsel %vm3553, %v3540, %v3542
  %v3557 = vsel %vm3553, %v3542, %v3544
  %v3558 = vsel %vm3553, %v3544, %v3546
  %v3559 = vsel %vm3553, %v3546, %v3548
  %v3560 = vsel %vm3553, %v3548, %v3550
  %v3561 = vsel %vm3553, %v3550, %v3552
  %v3563 = vsel %vm161, %v94, 0
  %v3566 = vsel %vm165, %v3554, 0
  %v3569 = vsel %vm165, %v3555, 0
  %v3572 = vsel %vm165, %v3556, 0
  %v3575 = vsel %vm165, %v3557, 0
  %v3578 = vsel %vm165, %v3558, 0
  %v3581 = vsel %vm165, %v3559, 0
  %v3584 = vsel %vm165, %v3560, 0
  %v3587 = vsel %vm165, %v3561, 0
  %3589 = vmatprep.subr.bf16.mxu0 %v3569
  %3590 = vmatpush1.bf16.msra.mxu0 %v3566
  %3591 = vmatprep.subr.bf16.mxu0 0
  %3592 = vmatpush1.bf16.msra.mxu0 0
  %3593 = vmatprep.subr.bf16.mxu0 0
  %3594 = vmatpush1.bf16.msra.mxu0 0
  %3595 = vmatprep.subr.bf16.mxu0 0
  %3596 = vmatpush1.bf16.msra.mxu0 0
  %3597 = vmatprep.subr.bf16.mxu0 0
  %3598 = vmatpush1.bf16.msra.mxu0 0
  %3599 = vmatprep.subr.bf16.mxu0 0
  %3600 = vmatpush1.bf16.msra.mxu0 0
  %3601 = vmatprep.subr.bf16.mxu0 0
  %3602 = vmatpush1.bf16.msra.mxu0 0
  %3603 = vmatprep.subr.bf16.mxu0 0
  %3604 = vmatpush1.bf16.msra.mxu0 0
  %3605 = vmatprep.subr.bf16.mxu0 0
  %3606 = vmatpush1.bf16.msra.mxu0 0
  %3607 = vmatprep.subr.bf16.mxu0 0
  %3608 = vmatpush1.bf16.msra.mxu0 0
  %3609 = vmatprep.subr.bf16.mxu0 0
  %3610 = vmatpush1.bf16.msra.mxu0 0
  %3611 = vmatprep.subr.bf16.mxu0 0
  %3612 = vmatpush1.bf16.msra.mxu0 0
  %3613 = vmatprep.subr.bf16.mxu0 0
  %3614 = vmatpush1.bf16.msra.mxu0 0
  %3615 = vmatprep.subr.bf16.mxu0 0
  %3616 = vmatpush1.bf16.msra.mxu0 0
  %3617 = vmatprep.subr.bf16.mxu0 0
  %3618 = vmatpush1.bf16.msra.mxu0 0
  %3619 = vmatprep.subr.bf16.mxu0 0
  %3620 = vmatpush1.bf16.msra.mxu0 0
  %3621 = vmatprep.mubr.bf16.mxu0 0
  %3622 = vmatmul.mubr.bf16.gmra.mrb[0].mxu0 %v3563
  %v3623 = vpop.f32.mrb[0].mxu0
  %v3624 = vadd.f32 0.0, %v3623
  %v3625 = vpop.f32.mrb[0].mxu0
  %v3626 = vadd.f32 0.0, %v3625
  %v3627 = vpop.f32.mrb[0].mxu0
  %v3628 = vpop.f32.mrb[0].mxu0
  %3629 = vdwg.mxu0
  %3630 = vmatprep.subr.bf16.mxu0 %v3575
  %3631 = vmatpush1.bf16.msra.mxu0 %v3572
  %3632 = vmatprep.subr.bf16.mxu0 0
  %3633 = vmatpush1.bf16.msra.mxu0 0
  %3634 = vmatprep.subr.bf16.mxu0 0
  %3635 = vmatpush1.bf16.msra.mxu0 0
  %3636 = vmatprep.subr.bf16.mxu0 0
  %3637 = vmatpush1.bf16.msra.mxu0 0
  %3638 = vmatprep.subr.bf16.mxu0 0
  %3639 = vmatpush1.bf16.msra.mxu0 0
  %3640 = vmatprep.subr.bf16.mxu0 0
  %3641 = vmatpush1.bf16.msra.mxu0 0
  %3642 = vmatprep.subr.bf16.mxu0 0
  %3643 = vmatpush1.bf16.msra.mxu0 0
  %3644 = vmatprep.subr.bf16.mxu0 0
  %3645 = vmatpush1.bf16.msra.mxu0 0
  %3646 = vmatprep.subr.bf16.mxu0 0
  %3647 = vmatpush1.bf16.msra.mxu0 0
  %3648 = vmatprep.subr.bf16.mxu0 0
  %3649 = vmatpush1.bf16.msra.mxu0 0
  %3650 = vmatprep.subr.bf16.mxu0 0
  %3651 = vmatpush1.bf16.msra.mxu0 0
  %3652 = vmatprep.subr.bf16.mxu0 0
  %3653 = vmatpush1.bf16.msra.mxu0 0
  %3654 = vmatprep.subr.bf16.mxu0 0
  %3655 = vmatpush1.bf16.msra.mxu0 0
  %3656 = vmatprep.subr.bf16.mxu0 0
  %3657 = vmatpush1.bf16.msra.mxu0 0
  %3658 = vmatprep.subr.bf16.mxu0 0
  %3659 = vmatpush1.bf16.msra.mxu0 0
  %3660 = vmatprep.subr.bf16.mxu0 0
  %3661 = vmatpush1.bf16.msra.mxu0 0
  %3662 = vmatprep.mubr.bf16.mxu0 0
  %3663 = vmatmul.mubr.bf16.gmra.mrb[0].mxu0 %v3563
  %v3664 = vpop.f32.mrb[0].mxu0
  %v3665 = vadd.f32 0.0, %v3664
  %v3666 = vpop.f32.mrb[0].mxu0
  %v3667 = vadd.f32 0.0, %v3666
  %v3668 = vpop.f32.mrb[0].mxu0
  %v3669 = vpop.f32.mrb[0].mxu0
  %3670 = vdwg.mxu0
  %3671 = vmatprep.subr.bf16.mxu0 %v3581
  %3672 = vmatpush1.bf16.msra.mxu0 %v3578
  %3673 = vmatprep.subr.bf16.mxu0 0
  %3674 = vmatpush1.bf16.msra.mxu0 0
  %3675 = vmatprep.subr.bf16.mxu0 0
  %3676 = vmatpush1.bf16.msra.mxu0 0
  %3677 = vmatprep.subr.bf16.mxu0 0
  %3678 = vmatpush1.bf16.msra.mxu0 0
  %3679 = vmatprep.subr.bf16.mxu0 0
  %3680 = vmatpush1.bf16.msra.mxu0 0
  %3681 = vmatprep.subr.bf16.mxu0 0
  %3682 = vmatpush1.bf16.msra.mxu0 0
  %3683 = vmatprep.subr.bf16.mxu0 0
  %3684 = vmatpush1.bf16.msra.mxu0 0
  %3685 = vmatprep.subr.bf16.mxu0 0
  %3686 = vmatpush1.bf16.msra.mxu0 0
  %3687 = vmatprep.subr.bf16.mxu0 0
  %3688 = vmatpush1.bf16.msra.mxu0 0
  %3689 = vmatprep.subr.bf16.mxu0 0
  %3690 = vmatpush1.bf16.msra.mxu0 0
  %3691 = vmatprep.subr.bf16.mxu0 0
  %3692 = vmatpush1.bf16.msra.mxu0 0
  %3693 = vmatprep.subr.bf16.mxu0 0
  %3694 = vmatpush1.bf16.msra.mxu0 0
  %3695 = vmatprep.subr.bf16.mxu0 0
  %3696 = vmatpush1.bf16.msra.mxu0 0
  %3697 = vmatprep.subr.bf16.mxu0 0
  %3698 = vmatpush1.bf16.msra.mxu0 0
  %3699 = vmatprep.subr.bf16.mxu0 0
  %3700 = vmatpush1.bf16.msra.mxu0 0
  %3701 = vmatprep.subr.bf16.mxu0 0
  %3702 = vmatpush1.bf16.msra.mxu0 0
  %3703 = vmatprep.mubr.bf16.mxu0 0
  %3704 = vmatmul.mubr.bf16.gmra.mrb[0].mxu0 %v3563
  %v3705 = vpop.f32.mrb[0].mxu0
  %v3706 = vadd.f32 0.0, %v3705
  %v3707 = vpop.f32.mrb[0].mxu0
  %v3708 = vadd.f32 0.0, %v3707
  %v3709 = vpop.f32.mrb[0].mxu0
  %v3710 = vpop.f32.mrb[0].mxu0
  %3711 = vdwg.mxu0
  %3712 = vmatprep.subr.bf16.mxu0 %v3587
  %3713 = vmatpush1.bf16.msra.mxu0 %v3584
  %3714 = vmatprep.subr.bf16.mxu0 0
  %3715 = vmatpush1.bf16.msra.mxu0 0
  %3716 = vmatprep.subr.bf16.mxu0 0
  %3717 = vmatpush1.bf16.msra.mxu0 0
  %3718 = vmatprep.subr.bf16.mxu0 0
  %3719 = vmatpush1.bf16.msra.mxu0 0
  %3720 = vmatprep.subr.bf16.mxu0 0
  %3721 = vmatpush1.bf16.msra.mxu0 0
  %3722 = vmatprep.subr.bf16.mxu0 0
  %3723 = vmatpush1.bf16.msra.mxu0 0
  %3724 = vmatprep.subr.bf16.mxu0 0
  %3725 = vmatpush1.bf16.msra.mxu0 0
  %3726 = vmatprep.subr.bf16.mxu0 0
  %3727 = vmatpush1.bf16.msra.mxu0 0
  %3728 = vmatprep.subr.bf16.mxu0 0
  %3729 = vmatpush1.bf16.msra.mxu0 0
  %3730 = vmatprep.subr.bf16.mxu0 0
  %3731 = vmatpush1.bf16.msra.mxu0 0
  %3732 = vmatprep.subr.bf16.mxu0 0
  %3733 = vmatpush1.bf16.msra.mxu0 0
  %3734 = vmatprep.subr.bf16.mxu0 0
  %3735 = vmatpush1.bf16.msra.mxu0 0
  %3736 = vmatprep.subr.bf16.mxu0 0
  %3737 = vmatpush1.bf16.msra.mxu0 0
  %3738 = vmatprep.subr.bf16.mxu0 0
  %3739 = vmatpush1.bf16.msra.mxu0 0
  %3740 = vmatprep.subr.bf16.mxu0 0
  %3741 = vmatpush1.bf16.msra.mxu0 0
  %3742 = vmatprep.subr.bf16.mxu0 0
  %3743 = vmatpush1.bf16.msra.mxu0 0
  %3744 = vmatprep.mubr.bf16.mxu0 0
  %3745 = vmatmul.mubr.bf16.gmra.mrb[0].mxu0 %v3563
  %v3746 = vpop.f32.mrb[0].mxu0
  %v3747 = vadd.f32 0.0, %v3746
  %v3748 = vpop.f32.mrb[0].mxu0
  %v3749 = vadd.f32 0.0, %v3748
  %v3750 = vpop.f32.mrb[0].mxu0
  %v3751 = vpop.f32.mrb[0].mxu0
  %3752 = vdwg.mxu0
  %v3753 = vadd.f32 %v3527, %v3624
  %v3754 = vadd.f32 %v3528, %v3626
  %v3755 = vadd.f32 %v3529, %v3665
  %v3756 = vadd.f32 %v3530, %v3667
  %v3757 = vadd.f32 %v3531, %v3706
  %v3758 = vadd.f32 %v3532, %v3708
  %v3759 = vadd.f32 %v3533, %v3747
  %v3760 = vadd.f32 %v3534, %v3749
  %3761 = vrot.lane.b32.xlu0 %v3300, 118
  %v3762 = vpop.permute.xlu0 %3761
  %3763 = vrot.lane.b32.xlu0 %v3301, 118
  %v3764 = vpop.permute.xlu0 %3763
  %3765 = vrot.lane.b32.xlu0 %v3302, 118
  %v3766 = vpop.permute.xlu0 %3765
  %3767 = vrot.lane.b32.xlu0 %v3303, 118
  %v3768 = vpop.permute.xlu0 %3767
  %3769 = vrot.lane.b32.xlu0 %v3304, 118
  %v3770 = vpop.permute.xlu0 %3769
  %3771 = vrot.lane.b32.xlu0 %v3305, 118
  %v3772 = vpop.permute.xlu0 %3771
  %3773 = vrot.lane.b32.xlu0 %v3306, 118
  %v3774 = vpop.permute.xlu0 %3773
  %3775 = vrot.lane.b32.xlu0 %v3307, 118
  %v3776 = vpop.permute.xlu0 %3775
  %3777 = vrot.lane.b32.xlu0 %v3308, 118
  %v3778 = vpop.permute.xlu0 %3777
  %vm3779 = vcmask 965632
  %v3780 = vsel %vm3779, %v3762, %v3764
  %v3781 = vsel %vm3779, %v3764, %v3766
  %v3782 = vsel %vm3779, %v3766, %v3768
  %v3783 = vsel %vm3779, %v3768, %v3770
  %v3784 = vsel %vm3779, %v3770, %v3772
  %v3785 = vsel %vm3779, %v3772, %v3774
  %v3786 = vsel %vm3779, %v3774, %v3776
  %v3787 = vsel %vm3779, %v3776, %v3778
  %v3789 = vsel %vm161, %v95, 0
  %v3792 = vsel %vm165, %v3780, 0
  %v3795 = vsel %vm165, %v3781, 0
  %v3798 = vsel %vm165, %v3782, 0
  %v3801 = vsel %vm165, %v3783, 0
  %v3804 = vsel %vm165, %v3784, 0
  %v3807 = vsel %vm165, %v3785, 0
  %v3810 = vsel %vm165, %v3786, 0
  %v3813 = vsel %vm165, %v3787, 0
  %3815 = vmatprep.subr.bf16.mxu0 %v3795
  %3816 = vmatpush1.bf16.msra.mxu0 %v3792
  %3817 = vmatprep.subr.bf16.mxu0 0
  %3818 = vmatpush1.bf16.msra.mxu0 0
  %3819 = vmatprep.subr.bf16.mxu0 0
  %3820 = vmatpush1.bf16.msra.mxu0 0
  %3821 = vmatprep.subr.bf16.mxu0 0
  %3822 = vmatpush1.bf16.msra.mxu0 0
  %3823 = vmatprep.subr.bf16.mxu0 0
  %3824 = vmatpush1.bf16.msra.mxu0 0
  %3825 = vmatprep.subr.bf16.mxu0 0
  %3826 = vmatpush1.bf16.msra.mxu0 0
  %3827 = vmatprep.subr.bf16.mxu0 0
  %3828 = vmatpush1.bf16.msra.mxu0 0
  %3829 = vmatprep.subr.bf16.mxu0 0
  %3830 = vmatpush1.bf16.msra.mxu0 0
  %3831 = vmatprep.subr.bf16.mxu0 0
  %3832 = vmatpush1.bf16.msra.mxu0 0
  %3833 = vmatprep.subr.bf16.mxu0 0
  %3834 = vmatpush1.bf16.msra.mxu0 0
  %3835 = vmatprep.subr.bf16.mxu0 0
  %3836 = vmatpush1.bf16.msra.mxu0 0
  %3837 = vmatprep.subr.bf16.mxu0 0
  %3838 = vmatpush1.bf16.msra.mxu0 0
  %3839 = vmatprep.subr.bf16.mxu0 0
  %3840 = vmatpush1.bf16.msra.mxu0 0
  %3841 = vmatprep.subr.bf16.mxu0 0
  %3842 = vmatpush1.bf16.msra.mxu0 0
  %3843 = vmatprep.subr.bf16.mxu0 0
  %3844 = vmatpush1.bf16.msra.mxu0 0
  %3845 = vmatprep.subr.bf16.mxu0 0
  %3846 = vmatpush1.bf16.msra.mxu0 0
  %3847 = vmatprep.mubr.bf16.mxu0 0
  %3848 = vmatmul.mubr.bf16.gmra.mrb[0].mxu0 %v3789
  %v3849 = vpop.f32.mrb[0].mxu0
  %v3850 = vadd.f32 0.0, %v3849
  %v3851 = vpop.f32.mrb[0].mxu0
  %v3852 = vadd.f32 0.0, %v3851
  %v3853 = vpop.f32.mrb[0].mxu0
  %v3854 = vpop.f32.mrb[0].mxu0
  %3855 = vdwg.mxu0
  %3856 = vmatprep.subr.bf16.mxu0 %v3801
  %3857 = vmatpush1.bf16.msra.mxu0 %v3798
  %3858 = vmatprep.subr.bf16.mxu0 0
  %3859 = vmatpush1.bf16.msra.mxu0 0
  %3860 = vmatprep.subr.bf16.mxu0 0
  %3861 = vmatpush1.bf16.msra.mxu0 0
  %3862 = vmatprep.subr.bf16.mxu0 0
  %3863 = vmatpush1.bf16.msra.mxu0 0
  %3864 = vmatprep.subr.bf16.mxu0 0
  %3865 = vmatpush1.bf16.msra.mxu0 0
  %3866 = vmatprep.subr.bf16.mxu0 0
  %3867 = vmatpush1.bf16.msra.mxu0 0
  %3868 = vmatprep.subr.bf16.mxu0 0
  %3869 = vmatpush1.bf16.msra.mxu0 0
  %3870 = vmatprep.subr.bf16.mxu0 0
  %3871 = vmatpush1.bf16.msra.mxu0 0
  %3872 = vmatprep.subr.bf16.mxu0 0
  %3873 = vmatpush1.bf16.msra.mxu0 0
  %3874 = vmatprep.subr.bf16.mxu0 0
  %3875 = vmatpush1.bf16.msra.mxu0 0
  %3876 = vmatprep.subr.bf16.mxu0 0
  %3877 = vmatpush1.bf16.msra.mxu0 0
  %3878 = vmatprep.subr.bf16.mxu0 0
  %3879 = vmatpush1.bf16.msra.mxu0 0
  %3880 = vmatprep.subr.bf16.mxu0 0
  %3881 = vmatpush1.bf16.msra.mxu0 0
  %3882 = vmatprep.subr.bf16.mxu0 0
  %3883 = vmatpush1.bf16.msra.mxu0 0
  %3884 = vmatprep.subr.bf16.mxu0 0
  %3885 = vmatpush1.bf16.msra.mxu0 0
  %3886 = vmatprep.subr.bf16.mxu0 0
  %3887 = vmatpush1.bf16.msra.mxu0 0
  %3888 = vmatprep.mubr.bf16.mxu0 0
  %3889 = vmatmul.mubr.bf16.gmra.mrb[0].mxu0 %v3789
  %v3890 = vpop.f32.mrb[0].mxu0
  %v3891 = vadd.f32 0.0, %v3890
  %v3892 = vpop.f32.mrb[0].mxu0
  %v3893 = vadd.f32 0.0, %v3892
  %v3894 = vpop.f32.mrb[0].mxu0
  %v3895 = vpop.f32.mrb[0].mxu0
  %3896 = vdwg.mxu0
  %3897 = vmatprep.subr.bf16.mxu0 %v3807
  %3898 = vmatpush1.bf16.msra.mxu0 %v3804
  %3899 = vmatprep.subr.bf16.mxu0 0
  %3900 = vmatpush1.bf16.msra.mxu0 0
  %3901 = vmatprep.subr.bf16.mxu0 0
  %3902 = vmatpush1.bf16.msra.mxu0 0
  %3903 = vmatprep.subr.bf16.mxu0 0
  %3904 = vmatpush1.bf16.msra.mxu0 0
  %3905 = vmatprep.subr.bf16.mxu0 0
  %3906 = vmatpush1.bf16.msra.mxu0 0
  %3907 = vmatprep.subr.bf16.mxu0 0
  %3908 = vmatpush1.bf16.msra.mxu0 0
  %3909 = vmatprep.subr.bf16.mxu0 0
  %3910 = vmatpush1.bf16.msra.mxu0 0
  %3911 = vmatprep.subr.bf16.mxu0 0
  %3912 = vmatpush1.bf16.msra.mxu0 0
  %3913 = vmatprep.subr.bf16.mxu0 0
  %3914 = vmatpush1.bf16.msra.mxu0 0
  %3915 = vmatprep.subr.bf16.mxu0 0
  %3916 = vmatpush1.bf16.msra.mxu0 0
  %3917 = vmatprep.subr.bf16.mxu0 0
  %3918 = vmatpush1.bf16.msra.mxu0 0
  %3919 = vmatprep.subr.bf16.mxu0 0
  %3920 = vmatpush1.bf16.msra.mxu0 0
  %3921 = vmatprep.subr.bf16.mxu0 0
  %3922 = vmatpush1.bf16.msra.mxu0 0
  %3923 = vmatprep.subr.bf16.mxu0 0
  %3924 = vmatpush1.bf16.msra.mxu0 0
  %3925 = vmatprep.subr.bf16.mxu0 0
  %3926 = vmatpush1.bf16.msra.mxu0 0
  %3927 = vmatprep.subr.bf16.mxu0 0
  %3928 = vmatpush1.bf16.msra.mxu0 0
  %3929 = vmatprep.mubr.bf16.mxu0 0
  %3930 = vmatmul.mubr.bf16.gmra.mrb[0].mxu0 %v3789
  %v3931 = vpop.f32.mrb[0].mxu0
  %v3932 = vadd.f32 0.0, %v3931
  %v3933 = vpop.f32.mrb[0].mxu0
  %v3934 = vadd.f32 0.0, %v3933
  %v3935 = vpop.f32.mrb[0].mxu0
  %v3936 = vpop.f32.mrb[0].mxu0
  %3937 = vdwg.mxu0
  %3938 = vmatprep.subr.bf16.mxu0 %v3813
  %3939 = vmatpush1.bf16.msra.mxu0 %v3810
  %3940 = vmatprep.subr.bf16.mxu0 0
  %3941 = vmatpush1.bf16.msra.mxu0 0
  %3942 = vmatprep.subr.bf16.mxu0 0
  %3943 = vmatpush1.bf16.msra.mxu0 0
  %3944 = vmatprep.subr.bf16.mxu0 0
  %3945 = vmatpush1.bf16.msra.mxu0 0
  %3946 = vmatprep.subr.bf16.mxu0 0
  %3947 = vmatpush1.bf16.msra.mxu0 0
  %3948 = vmatprep.subr.bf16.mxu0 0
  %3949 = vmatpush1.bf16.msra.mxu0 0
  %3950 = vmatprep.subr.bf16.mxu0 0
  %3951 = vmatpush1.bf16.msra.mxu0 0
  %3952 = vmatprep.subr.bf16.mxu0 0
  %3953 = vmatpush1.bf16.msra.mxu0 0
  %3954 = vmatprep.subr.bf16.mxu0 0
  %3955 = vmatpush1.bf16.msra.mxu0 0
  %3956 = vmatprep.subr.bf16.mxu0 0
  %3957 = vmatpush1.bf16.msra.mxu0 0
  %3958 = vmatprep.subr.bf16.mxu0 0
  %3959 = vmatpush1.bf16.msra.mxu0 0
  %3960 = vmatprep.subr.bf16.mxu0 0
  %3961 = vmatpush1.bf16.msra.mxu0 0
  %3962 = vmatprep.subr.bf16.mxu0 0
  %3963 = vmatpush1.bf16.msra.mxu0 0
  %3964 = vmatprep.subr.bf16.mxu0 0
  %3965 = vmatpush1.bf16.msra.mxu0 0
  %3966 = vmatprep.subr.bf16.mxu0 0
  %3967 = vmatpush1.bf16.msra.mxu0 0
  %3968 = vmatprep.subr.bf16.mxu0 0
  %3969 = vmatpush1.bf16.msra.mxu0 0
  %3970 = vmatprep.mubr.bf16.mxu0 0
  %3971 = vmatmul.mubr.bf16.gmra.mrb[0].mxu0 %v3789
  %v3972 = vpop.f32.mrb[0].mxu0
  %v3973 = vadd.f32 0.0, %v3972
  %v3974 = vpop.f32.mrb[0].mxu0
  %v3975 = vadd.f32 0.0, %v3974
  %v3976 = vpop.f32.mrb[0].mxu0
  %v3977 = vpop.f32.mrb[0].mxu0
  %3978 = vdwg.mxu0
  %v3979 = vadd.f32 %v3753, %v3850
  %v3980 = vadd.f32 %v3754, %v3852
  %v3981 = vadd.f32 %v3755, %v3891
  %v3982 = vadd.f32 %v3756, %v3893
  %v3983 = vadd.f32 %v3757, %v3932
  %v3984 = vadd.f32 %v3758, %v3934
  %v3985 = vadd.f32 %v3759, %v3973
  %v3986 = vadd.f32 %v3760, %v3975
  %3987 = vrot.lane.b32.xlu0 %v3300, 117
  %v3988 = vpop.permute.xlu0 %3987
  %3989 = vrot.lane.b32.xlu0 %v3301, 117
  %v3990 = vpop.permute.xlu0 %3989
  %3991 = vrot.lane.b32.xlu0 %v3302, 117
  %v3992 = vpop.permute.xlu0 %3991
  %3993 = vrot.lane.b32.xlu0 %v3303, 117
  %v3994 = vpop.permute.xlu0 %3993
  %3995 = vrot.lane.b32.xlu0 %v3304, 117
  %v3996 = vpop.permute.xlu0 %3995
  %3997 = vrot.lane.b32.xlu0 %v3305, 117
  %v3998 = vpop.permute.xlu0 %3997
  %3999 = vrot.lane.b32.xlu0 %v3306, 117
  %v4000 = vpop.permute.xlu0 %3999
  %4001 = vrot.lane.b32.xlu0 %v3307, 117
  %v4002 = vpop.permute.xlu0 %4001
  %4003 = vrot.lane.b32.xlu0 %v3308, 117
  %v4004 = vpop.permute.xlu0 %4003
  %vm4005 = vcmask 957440
  %v4006 = vsel %vm4005, %v3988, %v3990
  %v4007 = vsel %vm4005, %v3990, %v3992
  %v4008 = vsel %vm4005, %v3992, %v3994
  %v4009 = vsel %vm4005, %v3994, %v3996
  %v4010 = vsel %vm4005, %v3996, %v3998
  %v4011 = vsel %vm4005, %v3998, %v4000
  %v4012 = vsel %vm4005, %v4000, %v4002
  %v4013 = vsel %vm4005, %v4002, %v4004
  %v4015 = vsel %vm161, %v96, 0
  %v4018 = vsel %vm165, %v4006, 0
  %v4021 = vsel %vm165, %v4007, 0
  %v4024 = vsel %vm165, %v4008, 0
  %v4027 = vsel %vm165, %v4009, 0
  %v4030 = vsel %vm165, %v4010, 0
  %v4033 = vsel %vm165, %v4011, 0
  %v4036 = vsel %vm165, %v4012, 0
  %v4039 = vsel %vm165, %v4013, 0
  %4041 = vmatprep.subr.bf16.mxu0 %v4021
  %4042 = vmatpush1.bf16.msra.mxu0 %v4018
  %4043 = vmatprep.subr.bf16.mxu0 0
  %4044 = vmatpush1.bf16.msra.mxu0 0
  %4045 = vmatprep.subr.bf16.mxu0 0
  %4046 = vmatpush1.bf16.msra.mxu0 0
  %4047 = vmatprep.subr.bf16.mxu0 0
  %4048 = vmatpush1.bf16.msra.mxu0 0
  %4049 = vmatprep.subr.bf16.mxu0 0
  %4050 = vmatpush1.bf16.msra.mxu0 0
  %4051 = vmatprep.subr.bf16.mxu0 0
  %4052 = vmatpush1.bf16.msra.mxu0 0
  %4053 = vmatprep.subr.bf16.mxu0 0
  %4054 = vmatpush1.bf16.msra.mxu0 0
  %4055 = vmatprep.subr.bf16.mxu0 0
  %4056 = vmatpush1.bf16.msra.mxu0 0
  %4057 = vmatprep.subr.bf16.mxu0 0
  %4058 = vmatpush1.bf16.msra.mxu0 0
  %4059 = vmatprep.subr.bf16.mxu0 0
  %4060 = vmatpush1.bf16.msra.mxu0 0
  %4061 = vmatprep.subr.bf16.mxu0 0
  %4062 = vmatpush1.bf16.msra.mxu0 0
  %4063 = vmatprep.subr.bf16.mxu0 0
  %4064 = vmatpush1.bf16.msra.mxu0 0
  %4065 = vmatprep.subr.bf16.mxu0 0
  %4066 = vmatpush1.bf16.msra.mxu0 0
  %4067 = vmatprep.subr.bf16.mxu0 0
  %4068 = vmatpush1.bf16.msra.mxu0 0
  %4069 = vmatprep.subr.bf16.mxu0 0
  %4070 = vmatpush1.bf16.msra.mxu0 0
  %4071 = vmatprep.subr.bf16.mxu0 0
  %4072 = vmatpush1.bf16.msra.mxu0 0
  %4073 = vmatprep.mubr.bf16.mxu0 0
  %4074 = vmatmul.mubr.bf16.gmra.mrb[0].mxu0 %v4015
  %v4075 = vpop.f32.mrb[0].mxu0
  %v4076 = vadd.f32 0.0, %v4075
  %v4077 = vpop.f32.mrb[0].mxu0
  %v4078 = vadd.f32 0.0, %v4077
  %v4079 = vpop.f32.mrb[0].mxu0
  %v4080 = vpop.f32.mrb[0].mxu0
  %4081 = vdwg.mxu0
  %4082 = vmatprep.subr.bf16.mxu0 %v4027
  %4083 = vmatpush1.bf16.msra.mxu0 %v4024
  %4084 = vmatprep.subr.bf16.mxu0 0
  %4085 = vmatpush1.bf16.msra.mxu0 0
  %4086 = vmatprep.subr.bf16.mxu0 0
  %4087 = vmatpush1.bf16.msra.mxu0 0
  %4088 = vmatprep.subr.bf16.mxu0 0
  %4089 = vmatpush1.bf16.msra.mxu0 0
  %4090 = vmatprep.subr.bf16.mxu0 0
  %4091 = vmatpush1.bf16.msra.mxu0 0
  %4092 = vmatprep.subr.bf16.mxu0 0
  %4093 = vmatpush1.bf16.msra.mxu0 0
  %4094 = vmatprep.subr.bf16.mxu0 0
  %4095 = vmatpush1.bf16.msra.mxu0 0
  %4096 = vmatprep.subr.bf16.mxu0 0
  %4097 = vmatpush1.bf16.msra.mxu0 0
  %4098 = vmatprep.subr.bf16.mxu0 0
  %4099 = vmatpush1.bf16.msra.mxu0 0
  %4100 = vmatprep.subr.bf16.mxu0 0
  %4101 = vmatpush1.bf16.msra.mxu0 0
  %4102 = vmatprep.subr.bf16.mxu0 0
  %4103 = vmatpush1.bf16.msra.mxu0 0
  %4104 = vmatprep.subr.bf16.mxu0 0
  %4105 = vmatpush1.bf16.msra.mxu0 0
  %4106 = vmatprep.subr.bf16.mxu0 0
  %4107 = vmatpush1.bf16.msra.mxu0 0
  %4108 = vmatprep.subr.bf16.mxu0 0
  %4109 = vmatpush1.bf16.msra.mxu0 0
  %4110 = vmatprep.subr.bf16.mxu0 0
  %4111 = vmatpush1.bf16.msra.mxu0 0
  %4112 = vmatprep.subr.bf16.mxu0 0
  %4113 = vmatpush1.bf16.msra.mxu0 0
  %4114 = vmatprep.mubr.bf16.mxu0 0
  %4115 = vmatmul.mubr.bf16.gmra.mrb[0].mxu0 %v4015
  %v4116 = vpop.f32.mrb[0].mxu0
  %v4117 = vadd.f32 0.0, %v4116
  %v4118 = vpop.f32.mrb[0].mxu0
  %v4119 = vadd.f32 0.0, %v4118
  %v4120 = vpop.f32.mrb[0].mxu0
  %v4121 = vpop.f32.mrb[0].mxu0
  %4122 = vdwg.mxu0
  %4123 = vmatprep.subr.bf16.mxu0 %v4033
  %4124 = vmatpush1.bf16.msra.mxu0 %v4030
  %4125 = vmatprep.subr.bf16.mxu0 0
  %4126 = vmatpush1.bf16.msra.mxu0 0
  %4127 = vmatprep.subr.bf16.mxu0 0
  %4128 = vmatpush1.bf16.msra.mxu0 0
  %4129 = vmatprep.subr.bf16.mxu0 0
  %4130 = vmatpush1.bf16.msra.mxu0 0
  %4131 = vmatprep.subr.bf16.mxu0 0
  %4132 = vmatpush1.bf16.msra.mxu0 0
  %4133 = vmatprep.subr.bf16.mxu0 0
  %4134 = vmatpush1.bf16.msra.mxu0 0
  %4135 = vmatprep.subr.bf16.mxu0 0
  %4136 = vmatpush1.bf16.msra.mxu0 0
  %4137 = vmatprep.subr.bf16.mxu0 0
  %4138 = vmatpush1.bf16.msra.mxu0 0
  %4139 = vmatprep.subr.bf16.mxu0 0
  %4140 = vmatpush1.bf16.msra.mxu0 0
  %4141 = vmatprep.subr.bf16.mxu0 0
  %4142 = vmatpush1.bf16.msra.mxu0 0
  %4143 = vmatprep.subr.bf16.mxu0 0
  %4144 = vmatpush1.bf16.msra.mxu0 0
  %4145 = vmatprep.subr.bf16.mxu0 0
  %4146 = vmatpush1.bf16.msra.mxu0 0
  %4147 = vmatprep.subr.bf16.mxu0 0
  %4148 = vmatpush1.bf16.msra.mxu0 0
  %4149 = vmatprep.subr.bf16.mxu0 0
  %4150 = vmatpush1.bf16.msra.mxu0 0
  %4151 = vmatprep.subr.bf16.mxu0 0
  %4152 = vmatpush1.bf16.msra.mxu0 0
  %4153 = vmatprep.subr.bf16.mxu0 0
  %4154 = vmatpush1.bf16.msra.mxu0 0
  %4155 = vmatprep.mubr.bf16.mxu0 0
  %4156 = vmatmul.mubr.bf16.gmra.mrb[0].mxu0 %v4015
  %v4157 = vpop.f32.mrb[0].mxu0
  %v4158 = vadd.f32 0.0, %v4157
  %v4159 = vpop.f32.mrb[0].mxu0
  %v4160 = vadd.f32 0.0, %v4159
  %v4161 = vpop.f32.mrb[0].mxu0
  %v4162 = vpop.f32.mrb[0].mxu0
  %4163 = vdwg.mxu0
  %4164 = vmatprep.subr.bf16.mxu0 %v4039
  %4165 = vmatpush1.bf16.msra.mxu0 %v4036
  %4166 = vmatprep.subr.bf16.mxu0 0
  %4167 = vmatpush1.bf16.msra.mxu0 0
  %4168 = vmatprep.subr.bf16.mxu0 0
  %4169 = vmatpush1.bf16.msra.mxu0 0
  %4170 = vmatprep.subr.bf16.mxu0 0
  %4171 = vmatpush1.bf16.msra.mxu0 0
  %4172 = vmatprep.subr.bf16.mxu0 0
  %4173 = vmatpush1.bf16.msra.mxu0 0
  %4174 = vmatprep.subr.bf16.mxu0 0
  %4175 = vmatpush1.bf16.msra.mxu0 0
  %4176 = vmatprep.subr.bf16.mxu0 0
  %4177 = vmatpush1.bf16.msra.mxu0 0
  %4178 = vmatprep.subr.bf16.mxu0 0
  %4179 = vmatpush1.bf16.msra.mxu0 0
  %4180 = vmatprep.subr.bf16.mxu0 0
  %4181 = vmatpush1.bf16.msra.mxu0 0
  %4182 = vmatprep.subr.bf16.mxu0 0
  %4183 = vmatpush1.bf16.msra.mxu0 0
  %4184 = vmatprep.subr.bf16.mxu0 0
  %4185 = vmatpush1.bf16.msra.mxu0 0
  %4186 = vmatprep.subr.bf16.mxu0 0
  %4187 = vmatpush1.bf16.msra.mxu0 0
  %4188 = vmatprep.subr.bf16.mxu0 0
  %4189 = vmatpush1.bf16.msra.mxu0 0
  %4190 = vmatprep.subr.bf16.mxu0 0
  %4191 = vmatpush1.bf16.msra.mxu0 0
  %4192 = vmatprep.subr.bf16.mxu0 0
  %4193 = vmatpush1.bf16.msra.mxu0 0
  %4194 = vmatprep.subr.bf16.mxu0 0
  %4195 = vmatpush1.bf16.msra.mxu0 0
  %4196 = vmatprep.mubr.bf16.mxu0 0
  %4197 = vmatmul.mubr.bf16.gmra.mrb[0].mxu0 %v4015
  %v4198 = vpop.f32.mrb[0].mxu0
  %v4199 = vadd.f32 0.0, %v4198
  %v4200 = vpop.f32.mrb[0].mxu0
  %v4201 = vadd.f32 0.0, %v4200
  %v4202 = vpop.f32.mrb[0].mxu0
  %v4203 = vpop.f32.mrb[0].mxu0
  %4204 = vdwg.mxu0
  %v4205 = vadd.f32 %v3979, %v4076
  %v4206 = vadd.f32 %v3980, %v4078
  %v4207 = vadd.f32 %v3981, %v4117
  %v4208 = vadd.f32 %v3982, %v4119
  %v4209 = vadd.f32 %v3983, %v4158
  %v4210 = vadd.f32 %v3984, %v4160
  %v4211 = vadd.f32 %v3985, %v4199
  %v4212 = vadd.f32 %v3986, %v4201
  %4213 = vrot.lane.b32.xlu0 %v3300, 39
  %v4214 = vpop.permute.xlu0 %4213
  %4215 = vrot.lane.b32.xlu0 %v3301, 39
  %v4216 = vpop.permute.xlu0 %4215
  %4217 = vrot.lane.b32.xlu0 %v3302, 39
  %v4218 = vpop.permute.xlu0 %4217
  %4219 = vrot.lane.b32.xlu0 %v3303, 39
  %v4220 = vpop.permute.xlu0 %4219
  %4221 = vrot.lane.b32.xlu0 %v3304, 39
  %v4222 = vpop.permute.xlu0 %4221
  %4223 = vrot.lane.b32.xlu0 %v3305, 39
  %v4224 = vpop.permute.xlu0 %4223
  %4225 = vrot.lane.b32.xlu0 %v3306, 39
  %v4226 = vpop.permute.xlu0 %4225
  %4227 = vrot.lane.b32.xlu0 %v3307, 39
  %v4228 = vpop.permute.xlu0 %4227
  %4229 = vrot.lane.b32.xlu0 %v3308, 39
  %v4230 = vpop.permute.xlu0 %4229
  %vm4231 = vcmask 318464
  %v4232 = vsel %vm4231, %v4214, %v4216
  %v4233 = vsel %vm4231, %v4216, %v4218
  %v4234 = vsel %vm4231, %v4218, %v4220
  %v4235 = vsel %vm4231, %v4220, %v4222
  %v4236 = vsel %vm4231, %v4222, %v4224
  %v4237 = vsel %vm4231, %v4224, %v4226
  %v4238 = vsel %vm4231, %v4226, %v4228
  %v4239 = vsel %vm4231, %v4228, %v4230
  %v4241 = vsel %vm161, %v97, 0
  %v4244 = vsel %vm165, %v4232, 0
  %v4247 = vsel %vm165, %v4233, 0
  %v4250 = vsel %vm165, %v4234, 0
  %v4253 = vsel %vm165, %v4235, 0
  %v4256 = vsel %vm165, %v4236, 0
  %v4259 = vsel %vm165, %v4237, 0
  %v4262 = vsel %vm165, %v4238, 0
  %v4265 = vsel %vm165, %v4239, 0
  %4267 = vmatprep.subr.bf16.mxu0 %v4247
  %4268 = vmatpush1.bf16.msra.mxu0 %v4244
  %4269 = vmatprep.subr.bf16.mxu0 0
  %4270 = vmatpush1.bf16.msra.mxu0 0
  %4271 = vmatprep.subr.bf16.mxu0 0
  %4272 = vmatpush1.bf16.msra.mxu0 0
  %4273 = vmatprep.subr.bf16.mxu0 0
  %4274 = vmatpush1.bf16.msra.mxu0 0
  %4275 = vmatprep.subr.bf16.mxu0 0
  %4276 = vmatpush1.bf16.msra.mxu0 0
  %4277 = vmatprep.subr.bf16.mxu0 0
  %4278 = vmatpush1.bf16.msra.mxu0 0
  %4279 = vmatprep.subr.bf16.mxu0 0
  %4280 = vmatpush1.bf16.msra.mxu0 0
  %4281 = vmatprep.subr.bf16.mxu0 0
  %4282 = vmatpush1.bf16.msra.mxu0 0
  %4283 = vmatprep.subr.bf16.mxu0 0
  %4284 = vmatpush1.bf16.msra.mxu0 0
  %4285 = vmatprep.subr.bf16.mxu0 0
  %4286 = vmatpush1.bf16.msra.mxu0 0
  %4287 = vmatprep.subr.bf16.mxu0 0
  %4288 = vmatpush1.bf16.msra.mxu0 0
  %4289 = vmatprep.subr.bf16.mxu0 0
  %4290 = vmatpush1.bf16.msra.mxu0 0
  %4291 = vmatprep.subr.bf16.mxu0 0
  %4292 = vmatpush1.bf16.msra.mxu0 0
  %4293 = vmatprep.subr.bf16.mxu0 0
  %4294 = vmatpush1.bf16.msra.mxu0 0
  %4295 = vmatprep.subr.bf16.mxu0 0
  %4296 = vmatpush1.bf16.msra.mxu0 0
  %4297 = vmatprep.subr.bf16.mxu0 0
  %4298 = vmatpush1.bf16.msra.mxu0 0
  %4299 = vmatprep.mubr.bf16.mxu0 0
  %4300 = vmatmul.mubr.bf16.gmra.mrb[0].mxu0 %v4241
  %v4301 = vpop.f32.mrb[0].mxu0
  %v4302 = vadd.f32 0.0, %v4301
  %v4303 = vpop.f32.mrb[0].mxu0
  %v4304 = vadd.f32 0.0, %v4303
  %v4305 = vpop.f32.mrb[0].mxu0
  %v4306 = vpop.f32.mrb[0].mxu0
  %4307 = vdwg.mxu0
  %4308 = vmatprep.subr.bf16.mxu0 %v4253
  %4309 = vmatpush1.bf16.msra.mxu0 %v4250
  %4310 = vmatprep.subr.bf16.mxu0 0
  %4311 = vmatpush1.bf16.msra.mxu0 0
  %4312 = vmatprep.subr.bf16.mxu0 0
  %4313 = vmatpush1.bf16.msra.mxu0 0
  %4314 = vmatprep.subr.bf16.mxu0 0
  %4315 = vmatpush1.bf16.msra.mxu0 0
  %4316 = vmatprep.subr.bf16.mxu0 0
  %4317 = vmatpush1.bf16.msra.mxu0 0
  %4318 = vmatprep.subr.bf16.mxu0 0
  %4319 = vmatpush1.bf16.msra.mxu0 0
  %4320 = vmatprep.subr.bf16.mxu0 0
  %4321 = vmatpush1.bf16.msra.mxu0 0
  %4322 = vmatprep.subr.bf16.mxu0 0
  %4323 = vmatpush1.bf16.msra.mxu0 0
  %4324 = vmatprep.subr.bf16.mxu0 0
  %4325 = vmatpush1.bf16.msra.mxu0 0
  %4326 = vmatprep.subr.bf16.mxu0 0
  %4327 = vmatpush1.bf16.msra.mxu0 0
  %4328 = vmatprep.subr.bf16.mxu0 0
  %4329 = vmatpush1.bf16.msra.mxu0 0
  %4330 = vmatprep.subr.bf16.mxu0 0
  %4331 = vmatpush1.bf16.msra.mxu0 0
  %4332 = vmatprep.subr.bf16.mxu0 0
  %4333 = vmatpush1.bf16.msra.mxu0 0
  %4334 = vmatprep.subr.bf16.mxu0 0
  %4335 = vmatpush1.bf16.msra.mxu0 0
  %4336 = vmatprep.subr.bf16.mxu0 0
  %4337 = vmatpush1.bf16.msra.mxu0 0
  %4338 = vmatprep.subr.bf16.mxu0 0
  %4339 = vmatpush1.bf16.msra.mxu0 0
  %4340 = vmatprep.mubr.bf16.mxu0 0
  %4341 = vmatmul.mubr.bf16.gmra.mrb[0].mxu0 %v4241
  %v4342 = vpop.f32.mrb[0].mxu0
  %v4343 = vadd.f32 0.0, %v4342
  %v4344 = vpop.f32.mrb[0].mxu0
  %v4345 = vadd.f32 0.0, %v4344
  %v4346 = vpop.f32.mrb[0].mxu0
  %v4347 = vpop.f32.mrb[0].mxu0
  %4348 = vdwg.mxu0
  %4349 = vmatprep.subr.bf16.mxu0 %v4259
  %4350 = vmatpush1.bf16.msra.mxu0 %v4256
  %4351 = vmatprep.subr.bf16.mxu0 0
  %4352 = vmatpush1.bf16.msra.mxu0 0
  %4353 = vmatprep.subr.bf16.mxu0 0
  %4354 = vmatpush1.bf16.msra.mxu0 0
  %4355 = vmatprep.subr.bf16.mxu0 0
  %4356 = vmatpush1.bf16.msra.mxu0 0
  %4357 = vmatprep.subr.bf16.mxu0 0
  %4358 = vmatpush1.bf16.msra.mxu0 0
  %4359 = vmatprep.subr.bf16.mxu0 0
  %4360 = vmatpush1.bf16.msra.mxu0 0
  %4361 = vmatprep.subr.bf16.mxu0 0
  %4362 = vmatpush1.bf16.msra.mxu0 0
  %4363 = vmatprep.subr.bf16.mxu0 0
  %4364 = vmatpush1.bf16.msra.mxu0 0
  %4365 = vmatprep.subr.bf16.mxu0 0
  %4366 = vmatpush1.bf16.msra.mxu0 0
  %4367 = vmatprep.subr.bf16.mxu0 0
  %4368 = vmatpush1.bf16.msra.mxu0 0
  %4369 = vmatprep.subr.bf16.mxu0 0
  %4370 = vmatpush1.bf16.msra.mxu0 0
  %4371 = vmatprep.subr.bf16.mxu0 0
  %4372 = vmatpush1.bf16.msra.mxu0 0
  %4373 = vmatprep.subr.bf16.mxu0 0
  %4374 = vmatpush1.bf16.msra.mxu0 0
  %4375 = vmatprep.subr.bf16.mxu0 0
  %4376 = vmatpush1.bf16.msra.mxu0 0
  %4377 = vmatprep.subr.bf16.mxu0 0
  %4378 = vmatpush1.bf16.msra.mxu0 0
  %4379 = vmatprep.subr.bf16.mxu0 0
  %4380 = vmatpush1.bf16.msra.mxu0 0
  %4381 = vmatprep.mubr.bf16.mxu0 0
  %4382 = vmatmul.mubr.bf16.gmra.mrb[0].mxu0 %v4241
  %v4383 = vpop.f32.mrb[0].mxu0
  %v4384 = vadd.f32 0.0, %v4383
  %v4385 = vpop.f32.mrb[0].mxu0
  %v4386 = vadd.f32 0.0, %v4385
  %v4387 = vpop.f32.mrb[0].mxu0
  %v4388 = vpop.f32.mrb[0].mxu0
  %4389 = vdwg.mxu0
  %4390 = vmatprep.subr.bf16.mxu0 %v4265
  %4391 = vmatpush1.bf16.msra.mxu0 %v4262
  %4392 = vmatprep.subr.bf16.mxu0 0
  %4393 = vmatpush1.bf16.msra.mxu0 0
  %4394 = vmatprep.subr.bf16.mxu0 0
  %4395 = vmatpush1.bf16.msra.mxu0 0
  %4396 = vmatprep.subr.bf16.mxu0 0
  %4397 = vmatpush1.bf16.msra.mxu0 0
  %4398 = vmatprep.subr.bf16.mxu0 0
  %4399 = vmatpush1.bf16.msra.mxu0 0
  %4400 = vmatprep.subr.bf16.mxu0 0
  %4401 = vmatpush1.bf16.msra.mxu0 0
  %4402 = vmatprep.subr.bf16.mxu0 0
  %4403 = vmatpush1.bf16.msra.mxu0 0
  %4404 = vmatprep.subr.bf16.mxu0 0
  %4405 = vmatpush1.bf16.msra.mxu0 0
  %4406 = vmatprep.subr.bf16.mxu0 0
  %4407 = vmatpush1.bf16.msra.mxu0 0
  %4408 = vmatprep.subr.bf16.mxu0 0
  %4409 = vmatpush1.bf16.msra.mxu0 0
  %4410 = vmatprep.subr.bf16.mxu0 0
  %4411 = vmatpush1.bf16.msra.mxu0 0
  %4412 = vmatprep.subr.bf16.mxu0 0
  %4413 = vmatpush1.bf16.msra.mxu0 0
  %4414 = vmatprep.subr.bf16.mxu0 0
  %4415 = vmatpush1.bf16.msra.mxu0 0
  %4416 = vmatprep.subr.bf16.mxu0 0
  %4417 = vmatpush1.bf16.msra.mxu0 0
  %4418 = vmatprep.subr.bf16.mxu0 0
  %4419 = vmatpush1.bf16.msra.mxu0 0
  %4420 = vmatprep.subr.bf16.mxu0 0
  %4421 = vmatpush1.bf16.msra.mxu0 0
  %4422 = vmatprep.mubr.bf16.mxu0 0
  %4423 = vmatmul.mubr.bf16.gmra.mrb[0].mxu0 %v4241
  %v4424 = vpop.f32.mrb[0].mxu0
  %v4425 = vadd.f32 0.0, %v4424
  %v4426 = vpop.f32.mrb[0].mxu0
  %v4427 = vadd.f32 0.0, %v4426
  %v4428 = vpop.f32.mrb[0].mxu0
  %v4429 = vpop.f32.mrb[0].mxu0
  %4430 = vdwg.mxu0
  %v4431 = vadd.f32 %v4205, %v4302
  %v4432 = vadd.f32 %v4206, %v4304
  %v4433 = vadd.f32 %v4207, %v4343
  %v4434 = vadd.f32 %v4208, %v4345
  %v4435 = vadd.f32 %v4209, %v4384
  %v4436 = vadd.f32 %v4210, %v4386
  %v4437 = vadd.f32 %v4211, %v4425
  %v4438 = vadd.f32 %v4212, %v4427
  %4439 = vrot.lane.b32.xlu0 %v3300, 38
  %v4440 = vpop.permute.xlu0 %4439
  %4441 = vrot.lane.b32.xlu0 %v3301, 38
  %v4442 = vpop.permute.xlu0 %4441
  %4443 = vrot.lane.b32.xlu0 %v3302, 38
  %v4444 = vpop.permute.xlu0 %4443
  %4445 = vrot.lane.b32.xlu0 %v3303, 38
  %v4446 = vpop.permute.xlu0 %4445
  %4447 = vrot.lane.b32.xlu0 %v3304, 38
  %v4448 = vpop.permute.xlu0 %4447
  %4449 = vrot.lane.b32.xlu0 %v3305, 38
  %v4450 = vpop.permute.xlu0 %4449
  %4451 = vrot.lane.b32.xlu0 %v3306, 38
  %v4452 = vpop.permute.xlu0 %4451
  %4453 = vrot.lane.b32.xlu0 %v3307, 38
  %v4454 = vpop.permute.xlu0 %4453
  %4455 = vrot.lane.b32.xlu0 %v3308, 38
  %v4456 = vpop.permute.xlu0 %4455
  %vm4457 = vcmask 310272
  %v4458 = vsel %vm4457, %v4440, %v4442
  %v4459 = vsel %vm4457, %v4442, %v4444
  %v4460 = vsel %vm4457, %v4444, %v4446
  %v4461 = vsel %vm4457, %v4446, %v4448
  %v4462 = vsel %vm4457, %v4448, %v4450
  %v4463 = vsel %vm4457, %v4450, %v4452
  %v4464 = vsel %vm4457, %v4452, %v4454
  %v4465 = vsel %vm4457, %v4454, %v4456
  %v4467 = vsel %vm161, %v98, 0
  %v4470 = vsel %vm165, %v4458, 0
  %v4473 = vsel %vm165, %v4459, 0
  %v4476 = vsel %vm165, %v4460, 0
  %v4479 = vsel %vm165, %v4461, 0
  %v4482 = vsel %vm165, %v4462, 0
  %v4485 = vsel %vm165, %v4463, 0
  %v4488 = vsel %vm165, %v4464, 0
  %v4491 = vsel %vm165, %v4465, 0
  %4493 = vmatprep.subr.bf16.mxu0 %v4473
  %4494 = vmatpush1.bf16.msra.mxu0 %v4470
  %4495 = vmatprep.subr.bf16.mxu0 0
  %4496 = vmatpush1.bf16.msra.mxu0 0
  %4497 = vmatprep.subr.bf16.mxu0 0
  %4498 = vmatpush1.bf16.msra.mxu0 0
  %4499 = vmatprep.subr.bf16.mxu0 0
  %4500 = vmatpush1.bf16.msra.mxu0 0
  %4501 = vmatprep.subr.bf16.mxu0 0
  %4502 = vmatpush1.bf16.msra.mxu0 0
  %4503 = vmatprep.subr.bf16.mxu0 0
  %4504 = vmatpush1.bf16.msra.mxu0 0
  %4505 = vmatprep.subr.bf16.mxu0 0
  %4506 = vmatpush1.bf16.msra.mxu0 0
  %4507 = vmatprep.subr.bf16.mxu0 0
  %4508 = vmatpush1.bf16.msra.mxu0 0
  %4509 = vmatprep.subr.bf16.mxu0 0
  %4510 = vmatpush1.bf16.msra.mxu0 0
  %4511 = vmatprep.subr.bf16.mxu0 0
  %4512 = vmatpush1.bf16.msra.mxu0 0
  %4513 = vmatprep.subr.bf16.mxu0 0
  %4514 = vmatpush1.bf16.msra.mxu0 0
  %4515 = vmatprep.subr.bf16.mxu0 0
  %4516 = vmatpush1.bf16.msra.mxu0 0
  %4517 = vmatprep.subr.bf16.mxu0 0
  %4518 = vmatpush1.bf16.msra.mxu0 0
  %4519 = vmatprep.subr.bf16.mxu0 0
  %4520 = vmatpush1.bf16.msra.mxu0 0
  %4521 = vmatprep.subr.bf16.mxu0 0
  %4522 = vmatpush1.bf16.msra.mxu0 0
  %4523 = vmatprep.subr.bf16.mxu0 0
  %4524 = vmatpush1.bf16.msra.mxu0 0
  %4525 = vmatprep.mubr.bf16.mxu0 0
  %4526 = vmatmul.mubr.bf16.gmra.mrb[0].mxu0 %v4467
  %v4527 = vpop.f32.mrb[0].mxu0
  %v4528 = vadd.f32 0.0, %v4527
  %v4529 = vpop.f32.mrb[0].mxu0
  %v4530 = vadd.f32 0.0, %v4529
  %v4531 = vpop.f32.mrb[0].mxu0
  %v4532 = vpop.f32.mrb[0].mxu0
  %4533 = vdwg.mxu0
  %4534 = vmatprep.subr.bf16.mxu0 %v4479
  %4535 = vmatpush1.bf16.msra.mxu0 %v4476
  %4536 = vmatprep.subr.bf16.mxu0 0
  %4537 = vmatpush1.bf16.msra.mxu0 0
  %4538 = vmatprep.subr.bf16.mxu0 0
  %4539 = vmatpush1.bf16.msra.mxu0 0
  %4540 = vmatprep.subr.bf16.mxu0 0
  %4541 = vmatpush1.bf16.msra.mxu0 0
  %4542 = vmatprep.subr.bf16.mxu0 0
  %4543 = vmatpush1.bf16.msra.mxu0 0
  %4544 = vmatprep.subr.bf16.mxu0 0
  %4545 = vmatpush1.bf16.msra.mxu0 0
  %4546 = vmatprep.subr.bf16.mxu0 0
  %4547 = vmatpush1.bf16.msra.mxu0 0
  %4548 = vmatprep.subr.bf16.mxu0 0
  %4549 = vmatpush1.bf16.msra.mxu0 0
  %4550 = vmatprep.subr.bf16.mxu0 0
  %4551 = vmatpush1.bf16.msra.mxu0 0
  %4552 = vmatprep.subr.bf16.mxu0 0
  %4553 = vmatpush1.bf16.msra.mxu0 0
  %4554 = vmatprep.subr.bf16.mxu0 0
  %4555 = vmatpush1.bf16.msra.mxu0 0
  %4556 = vmatprep.subr.bf16.mxu0 0
  %4557 = vmatpush1.bf16.msra.mxu0 0
  %4558 = vmatprep.subr.bf16.mxu0 0
  %4559 = vmatpush1.bf16.msra.mxu0 0
  %4560 = vmatprep.subr.bf16.mxu0 0
  %4561 = vmatpush1.bf16.msra.mxu0 0
  %4562 = vmatprep.subr.bf16.mxu0 0
  %4563 = vmatpush1.bf16.msra.mxu0 0
  %4564 = vmatprep.subr.bf16.mxu0 0
  %4565 = vmatpush1.bf16.msra.mxu0 0
  %4566 = vmatprep.mubr.bf16.mxu0 0
  %4567 = vmatmul.mubr.bf16.gmra.mrb[0].mxu0 %v4467
  %v4568 = vpop.f32.mrb[0].mxu0
  %v4569 = vadd.f32 0.0, %v4568
  %v4570 = vpop.f32.mrb[0].mxu0
  %v4571 = vadd.f32 0.0, %v4570
  %v4572 = vpop.f32.mrb[0].mxu0
  %v4573 = vpop.f32.mrb[0].mxu0
  %4574 = vdwg.mxu0
  %4575 = vmatprep.subr.bf16.mxu0 %v4485
  %4576 = vmatpush1.bf16.msra.mxu0 %v4482
  %4577 = vmatprep.subr.bf16.mxu0 0
  %4578 = vmatpush1.bf16.msra.mxu0 0
  %4579 = vmatprep.subr.bf16.mxu0 0
  %4580 = vmatpush1.bf16.msra.mxu0 0
  %4581 = vmatprep.subr.bf16.mxu0 0
  %4582 = vmatpush1.bf16.msra.mxu0 0
  %4583 = vmatprep.subr.bf16.mxu0 0
  %4584 = vmatpush1.bf16.msra.mxu0 0
  %4585 = vmatprep.subr.bf16.mxu0 0
  %4586 = vmatpush1.bf16.msra.mxu0 0
  %4587 = vmatprep.subr.bf16.mxu0 0
  %4588 = vmatpush1.bf16.msra.mxu0 0
  %4589 = vmatprep.subr.bf16.mxu0 0
  %4590 = vmatpush1.bf16.msra.mxu0 0
  %4591 = vmatprep.subr.bf16.mxu0 0
  %4592 = vmatpush1.bf16.msra.mxu0 0
  %4593 = vmatprep.subr.bf16.mxu0 0
  %4594 = vmatpush1.bf16.msra.mxu0 0
  %4595 = vmatprep.subr.bf16.mxu0 0
  %4596 = vmatpush1.bf16.msra.mxu0 0
  %4597 = vmatprep.subr.bf16.mxu0 0
  %4598 = vmatpush1.bf16.msra.mxu0 0
  %4599 = vmatprep.subr.bf16.mxu0 0
  %4600 = vmatpush1.bf16.msra.mxu0 0
  %4601 = vmatprep.subr.bf16.mxu0 0
  %4602 = vmatpush1.bf16.msra.mxu0 0
  %4603 = vmatprep.subr.bf16.mxu0 0
  %4604 = vmatpush1.bf16.msra.mxu0 0
  %4605 = vmatprep.subr.bf16.mxu0 0
  %4606 = vmatpush1.bf16.msra.mxu0 0
  %4607 = vmatprep.mubr.bf16.mxu0 0
  %4608 = vmatmul.mubr.bf16.gmra.mrb[0].mxu0 %v4467
  %v4609 = vpop.f32.mrb[0].mxu0
  %v4610 = vadd.f32 0.0, %v4609
  %v4611 = vpop.f32.mrb[0].mxu0
  %v4612 = vadd.f32 0.0, %v4611
  %v4613 = vpop.f32.mrb[0].mxu0
  %v4614 = vpop.f32.mrb[0].mxu0
  %4615 = vdwg.mxu0
  %4616 = vmatprep.subr.bf16.mxu0 %v4491
  %4617 = vmatpush1.bf16.msra.mxu0 %v4488
  %4618 = vmatprep.subr.bf16.mxu0 0
  %4619 = vmatpush1.bf16.msra.mxu0 0
  %4620 = vmatprep.subr.bf16.mxu0 0
  %4621 = vmatpush1.bf16.msra.mxu0 0
  %4622 = vmatprep.subr.bf16.mxu0 0
  %4623 = vmatpush1.bf16.msra.mxu0 0
  %4624 = vmatprep.subr.bf16.mxu0 0
  %4625 = vmatpush1.bf16.msra.mxu0 0
  %4626 = vmatprep.subr.bf16.mxu0 0
  %4627 = vmatpush1.bf16.msra.mxu0 0
  %4628 = vmatprep.subr.bf16.mxu0 0
  %4629 = vmatpush1.bf16.msra.mxu0 0
  %4630 = vmatprep.subr.bf16.mxu0 0
  %4631 = vmatpush1.bf16.msra.mxu0 0
  %4632 = vmatprep.subr.bf16.mxu0 0
  %4633 = vmatpush1.bf16.msra.mxu0 0
  %4634 = vmatprep.subr.bf16.mxu0 0
  %4635 = vmatpush1.bf16.msra.mxu0 0
  %4636 = vmatprep.subr.bf16.mxu0 0
  %4637 = vmatpush1.bf16.msra.mxu0 0
  %4638 = vmatprep.subr.bf16.mxu0 0
  %4639 = vmatpush1.bf16.msra.mxu0 0
  %4640 = vmatprep.subr.bf16.mxu0 0
  %4641 = vmatpush1.bf16.msra.mxu0 0
  %4642 = vmatprep.subr.bf16.mxu0 0
  %4643 = vmatpush1.bf16.msra.mxu0 0
  %4644 = vmatprep.subr.bf16.mxu0 0
  %4645 = vmatpush1.bf16.msra.mxu0 0
  %4646 = vmatprep.subr.bf16.mxu0 0
  %4647 = vmatpush1.bf16.msra.mxu0 0
  %4648 = vmatprep.mubr.bf16.mxu0 0
  %4649 = vmatmul.mubr.bf16.gmra.mrb[0].mxu0 %v4467
  %v4650 = vpop.f32.mrb[0].mxu0
  %v4651 = vadd.f32 0.0, %v4650
  %v4652 = vpop.f32.mrb[0].mxu0
  %v4653 = vadd.f32 0.0, %v4652
  %v4654 = vpop.f32.mrb[0].mxu0
  %v4655 = vpop.f32.mrb[0].mxu0
  %4656 = vdwg.mxu0
  %v4657 = vadd.f32 %v4431, %v4528
  %v4658 = vadd.f32 %v4432, %v4530
  %v4659 = vadd.f32 %v4433, %v4569
  %v4660 = vadd.f32 %v4434, %v4571
  %v4661 = vadd.f32 %v4435, %v4610
  %v4662 = vadd.f32 %v4436, %v4612
  %v4663 = vadd.f32 %v4437, %v4651
  %v4664 = vadd.f32 %v4438, %v4653
  %4665 = vrot.lane.b32.xlu0 %v3300, 37
  %v4666 = vpop.permute.xlu0 %4665
  %4667 = vrot.lane.b32.xlu0 %v3301, 37
  %v4668 = vpop.permute.xlu0 %4667
  %4669 = vrot.lane.b32.xlu0 %v3302, 37
  %v4670 = vpop.permute.xlu0 %4669
  %4671 = vrot.lane.b32.xlu0 %v3303, 37
  %v4672 = vpop.permute.xlu0 %4671
  %4673 = vrot.lane.b32.xlu0 %v3304, 37
  %v4674 = vpop.permute.xlu0 %4673
  %4675 = vrot.lane.b32.xlu0 %v3305, 37
  %v4676 = vpop.permute.xlu0 %4675
  %4677 = vrot.lane.b32.xlu0 %v3306, 37
  %v4678 = vpop.permute.xlu0 %4677
  %4679 = vrot.lane.b32.xlu0 %v3307, 37
  %v4680 = vpop.permute.xlu0 %4679
  %4681 = vrot.lane.b32.xlu0 %v3308, 37
  %v4682 = vpop.permute.xlu0 %4681
  %vm4683 = vcmask 302080
  %v4684 = vsel %vm4683, %v4666, %v4668
  %v4685 = vsel %vm4683, %v4668, %v4670
  %v4686 = vsel %vm4683, %v4670, %v4672
  %v4687 = vsel %vm4683, %v4672, %v4674
  %v4688 = vsel %vm4683, %v4674, %v4676
  %v4689 = vsel %vm4683, %v4676, %v4678
  %v4690 = vsel %vm4683, %v4678, %v4680
  %v4691 = vsel %vm4683, %v4680, %v4682
  %v4693 = vsel %vm161, %v99, 0
  %v4696 = vsel %vm165, %v4684, 0
  %v4699 = vsel %vm165, %v4685, 0
  %v4702 = vsel %vm165, %v4686, 0
  %v4705 = vsel %vm165, %v4687, 0
  %v4708 = vsel %vm165, %v4688, 0
  %v4711 = vsel %vm165, %v4689, 0
  %v4714 = vsel %vm165, %v4690, 0
  %v4717 = vsel %vm165, %v4691, 0
  %4719 = vmatprep.subr.bf16.mxu0 %v4699
  %4720 = vmatpush1.bf16.msra.mxu0 %v4696
  %4721 = vmatprep.subr.bf16.mxu0 0
  %4722 = vmatpush1.bf16.msra.mxu0 0
  %4723 = vmatprep.subr.bf16.mxu0 0
  %4724 = vmatpush1.bf16.msra.mxu0 0
  %4725 = vmatprep.subr.bf16.mxu0 0
  %4726 = vmatpush1.bf16.msra.mxu0 0
  %4727 = vmatprep.subr.bf16.mxu0 0
  %4728 = vmatpush1.bf16.msra.mxu0 0
  %4729 = vmatprep.subr.bf16.mxu0 0
  %4730 = vmatpush1.bf16.msra.mxu0 0
  %4731 = vmatprep.subr.bf16.mxu0 0
  %4732 = vmatpush1.bf16.msra.mxu0 0
  %4733 = vmatprep.subr.bf16.mxu0 0
  %4734 = vmatpush1.bf16.msra.mxu0 0
  %4735 = vmatprep.subr.bf16.mxu0 0
  %4736 = vmatpush1.bf16.msra.mxu0 0
  %4737 = vmatprep.subr.bf16.mxu0 0
  %4738 = vmatpush1.bf16.msra.mxu0 0
  %4739 = vmatprep.subr.bf16.mxu0 0
  %4740 = vmatpush1.bf16.msra.mxu0 0
  %4741 = vmatprep.subr.bf16.mxu0 0
  %4742 = vmatpush1.bf16.msra.mxu0 0
  %4743 = vmatprep.subr.bf16.mxu0 0
  %4744 = vmatpush1.bf16.msra.mxu0 0
  %4745 = vmatprep.subr.bf16.mxu0 0
  %4746 = vmatpush1.bf16.msra.mxu0 0
  %4747 = vmatprep.subr.bf16.mxu0 0
  %4748 = vmatpush1.bf16.msra.mxu0 0
  %4749 = vmatprep.subr.bf16.mxu0 0
  %4750 = vmatpush1.bf16.msra.mxu0 0
  %4751 = vmatprep.mubr.bf16.mxu0 0
  %4752 = vmatmul.mubr.bf16.gmra.mrb[0].mxu0 %v4693
  %v4753 = vpop.f32.mrb[0].mxu0
  %v4754 = vadd.f32 0.0, %v4753
  %v4755 = vpop.f32.mrb[0].mxu0
  %v4756 = vadd.f32 0.0, %v4755
  %v4757 = vpop.f32.mrb[0].mxu0
  %v4758 = vpop.f32.mrb[0].mxu0
  %4759 = vdwg.mxu0
  %4760 = vmatprep.subr.bf16.mxu0 %v4705
  %4761 = vmatpush1.bf16.msra.mxu0 %v4702
  %4762 = vmatprep.subr.bf16.mxu0 0
  %4763 = vmatpush1.bf16.msra.mxu0 0
  %4764 = vmatprep.subr.bf16.mxu0 0
  %4765 = vmatpush1.bf16.msra.mxu0 0
  %4766 = vmatprep.subr.bf16.mxu0 0
  %4767 = vmatpush1.bf16.msra.mxu0 0
  %4768 = vmatprep.subr.bf16.mxu0 0
  %4769 = vmatpush1.bf16.msra.mxu0 0
  %4770 = vmatprep.subr.bf16.mxu0 0
  %4771 = vmatpush1.bf16.msra.mxu0 0
  %4772 = vmatprep.subr.bf16.mxu0 0
  %4773 = vmatpush1.bf16.msra.mxu0 0
  %4774 = vmatprep.subr.bf16.mxu0 0
  %4775 = vmatpush1.bf16.msra.mxu0 0
  %4776 = vmatprep.subr.bf16.mxu0 0
  %4777 = vmatpush1.bf16.msra.mxu0 0
  %4778 = vmatprep.subr.bf16.mxu0 0
  %4779 = vmatpush1.bf16.msra.mxu0 0
  %4780 = vmatprep.subr.bf16.mxu0 0
  %4781 = vmatpush1.bf16.msra.mxu0 0
  %4782 = vmatprep.subr.bf16.mxu0 0
  %4783 = vmatpush1.bf16.msra.mxu0 0
  %4784 = vmatprep.subr.bf16.mxu0 0
  %4785 = vmatpush1.bf16.msra.mxu0 0
  %4786 = vmatprep.subr.bf16.mxu0 0
  %4787 = vmatpush1.bf16.msra.mxu0 0
  %4788 = vmatprep.subr.bf16.mxu0 0
  %4789 = vmatpush1.bf16.msra.mxu0 0
  %4790 = vmatprep.subr.bf16.mxu0 0
  %4791 = vmatpush1.bf16.msra.mxu0 0
  %4792 = vmatprep.mubr.bf16.mxu0 0
  %4793 = vmatmul.mubr.bf16.gmra.mrb[0].mxu0 %v4693
  %v4794 = vpop.f32.mrb[0].mxu0
  %v4795 = vadd.f32 0.0, %v4794
  %v4796 = vpop.f32.mrb[0].mxu0
  %v4797 = vadd.f32 0.0, %v4796
  %v4798 = vpop.f32.mrb[0].mxu0
  %v4799 = vpop.f32.mrb[0].mxu0
  %4800 = vdwg.mxu0
  %4801 = vmatprep.subr.bf16.mxu0 %v4711
  %4802 = vmatpush1.bf16.msra.mxu0 %v4708
  %4803 = vmatprep.subr.bf16.mxu0 0
  %4804 = vmatpush1.bf16.msra.mxu0 0
  %4805 = vmatprep.subr.bf16.mxu0 0
  %4806 = vmatpush1.bf16.msra.mxu0 0
  %4807 = vmatprep.subr.bf16.mxu0 0
  %4808 = vmatpush1.bf16.msra.mxu0 0
  %4809 = vmatprep.subr.bf16.mxu0 0
  %4810 = vmatpush1.bf16.msra.mxu0 0
  %4811 = vmatprep.subr.bf16.mxu0 0
  %4812 = vmatpush1.bf16.msra.mxu0 0
  %4813 = vmatprep.subr.bf16.mxu0 0
  %4814 = vmatpush1.bf16.msra.mxu0 0
  %4815 = vmatprep.subr.bf16.mxu0 0
  %4816 = vmatpush1.bf16.msra.mxu0 0
  %4817 = vmatprep.subr.bf16.mxu0 0
  %4818 = vmatpush1.bf16.msra.mxu0 0
  %4819 = vmatprep.subr.bf16.mxu0 0
  %4820 = vmatpush1.bf16.msra.mxu0 0
  %4821 = vmatprep.subr.bf16.mxu0 0
  %4822 = vmatpush1.bf16.msra.mxu0 0
  %4823 = vmatprep.subr.bf16.mxu0 0
  %4824 = vmatpush1.bf16.msra.mxu0 0
  %4825 = vmatprep.subr.bf16.mxu0 0
  %4826 = vmatpush1.bf16.msra.mxu0 0
  %4827 = vmatprep.subr.bf16.mxu0 0
  %4828 = vmatpush1.bf16.msra.mxu0 0
  %4829 = vmatprep.subr.bf16.mxu0 0
  %4830 = vmatpush1.bf16.msra.mxu0 0
  %4831 = vmatprep.subr.bf16.mxu0 0
  %4832 = vmatpush1.bf16.msra.mxu0 0
  %4833 = vmatprep.mubr.bf16.mxu0 0
  %4834 = vmatmul.mubr.bf16.gmra.mrb[0].mxu0 %v4693
  %v4835 = vpop.f32.mrb[0].mxu0
  %v4836 = vadd.f32 0.0, %v4835
  %v4837 = vpop.f32.mrb[0].mxu0
  %v4838 = vadd.f32 0.0, %v4837
  %v4839 = vpop.f32.mrb[0].mxu0
  %v4840 = vpop.f32.mrb[0].mxu0
  %4841 = vdwg.mxu0
  %4842 = vmatprep.subr.bf16.mxu0 %v4717
  %4843 = vmatpush1.bf16.msra.mxu0 %v4714
  %4844 = vmatprep.subr.bf16.mxu0 0
  %4845 = vmatpush1.bf16.msra.mxu0 0
  %4846 = vmatprep.subr.bf16.mxu0 0
  %4847 = vmatpush1.bf16.msra.mxu0 0
  %4848 = vmatprep.subr.bf16.mxu0 0
  %4849 = vmatpush1.bf16.msra.mxu0 0
  %4850 = vmatprep.subr.bf16.mxu0 0
  %4851 = vmatpush1.bf16.msra.mxu0 0
  %4852 = vmatprep.subr.bf16.mxu0 0
  %4853 = vmatpush1.bf16.msra.mxu0 0
  %4854 = vmatprep.subr.bf16.mxu0 0
  %4855 = vmatpush1.bf16.msra.mxu0 0
  %4856 = vmatprep.subr.bf16.mxu0 0
  %4857 = vmatpush1.bf16.msra.mxu0 0
  %4858 = vmatprep.subr.bf16.mxu0 0
  %4859 = vmatpush1.bf16.msra.mxu0 0
  %4860 = vmatprep.subr.bf16.mxu0 0
  %4861 = vmatpush1.bf16.msra.mxu0 0
  %4862 = vmatprep.subr.bf16.mxu0 0
  %4863 = vmatpush1.bf16.msra.mxu0 0
  %4864 = vmatprep.subr.bf16.mxu0 0
  %4865 = vmatpush1.bf16.msra.mxu0 0
  %4866 = vmatprep.subr.bf16.mxu0 0
  %4867 = vmatpush1.bf16.msra.mxu0 0
  %4868 = vmatprep.subr.bf16.mxu0 0
  %4869 = vmatpush1.bf16.msra.mxu0 0
  %4870 = vmatprep.subr.bf16.mxu0 0
  %4871 = vmatpush1.bf16.msra.mxu0 0
  %4872 = vmatprep.subr.bf16.mxu0 0
  %4873 = vmatpush1.bf16.msra.mxu0 0
  %4874 = vmatprep.mubr.bf16.mxu0 0
  %4875 = vmatmul.mubr.bf16.gmra.mrb[0].mxu0 %v4693
  %v4876 = vpop.f32.mrb[0].mxu0
  %v4877 = vadd.f32 0.0, %v4876
  %v4878 = vpop.f32.mrb[0].mxu0
  %v4879 = vadd.f32 0.0, %v4878
  %v4880 = vpop.f32.mrb[0].mxu0
  %v4881 = vpop.f32.mrb[0].mxu0
  %4882 = vdwg.mxu0
  %v4883 = vadd.f32 %v4657, %v4754
  %v4884 = vadd.f32 %v4658, %v4756
  %v4885 = vadd.f32 %v4659, %v4795
  %v4886 = vadd.f32 %v4660, %v4797
  %v4887 = vadd.f32 %v4661, %v4836
  %v4888 = vadd.f32 %v4662, %v4838
  %v4889 = vadd.f32 %v4663, %v4877
  %v4890 = vadd.f32 %v4664, %v4879
  %4891 = vrot.lane.b32.xlu0 %v3300, 29
  %v4892 = vpop.permute.xlu0 %4891
  %4893 = vrot.lane.b32.xlu0 %v3301, 29
  %v4894 = vpop.permute.xlu0 %4893
  %4895 = vrot.lane.b32.xlu0 %v3302, 29
  %v4896 = vpop.permute.xlu0 %4895
  %4897 = vrot.lane.b32.xlu0 %v3303, 29
  %v4898 = vpop.permute.xlu0 %4897
  %4899 = vrot.lane.b32.xlu0 %v3304, 29
  %v4900 = vpop.permute.xlu0 %4899
  %4901 = vrot.lane.b32.xlu0 %v3305, 29
  %v4902 = vpop.permute.xlu0 %4901
  %4903 = vrot.lane.b32.xlu0 %v3306, 29
  %v4904 = vpop.permute.xlu0 %4903
  %4905 = vrot.lane.b32.xlu0 %v3307, 29
  %v4906 = vpop.permute.xlu0 %4905
  %4907 = vrot.lane.b32.xlu0 %v3308, 29
  %v4908 = vpop.permute.xlu0 %4907
  %vm4909 = vcmask 236544
  %v4910 = vsel %vm4909, %v4892, %v4894
  %v4911 = vsel %vm4909, %v4894, %v4896
  %v4912 = vsel %vm4909, %v4896, %v4898
  %v4913 = vsel %vm4909, %v4898, %v4900
  %v4914 = vsel %vm4909, %v4900, %v4902
  %v4915 = vsel %vm4909, %v4902, %v4904
  %v4916 = vsel %vm4909, %v4904, %v4906
  %v4917 = vsel %vm4909, %v4906, %v4908
  %v4919 = vsel %vm161, %v100, 0
  %v4922 = vsel %vm165, %v4910, 0
  %v4925 = vsel %vm165, %v4911, 0
  %v4928 = vsel %vm165, %v4912, 0
  %v4931 = vsel %vm165, %v4913, 0
  %v4934 = vsel %vm165, %v4914, 0
  %v4937 = vsel %vm165, %v4915, 0
  %v4940 = vsel %vm165, %v4916, 0
  %v4943 = vsel %vm165, %v4917, 0
  %4945 = vmatprep.subr.bf16.mxu0 %v4925
  %4946 = vmatpush1.bf16.msra.mxu0 %v4922
  %4947 = vmatprep.subr.bf16.mxu0 0
  %4948 = vmatpush1.bf16.msra.mxu0 0
  %4949 = vmatprep.subr.bf16.mxu0 0
  %4950 = vmatpush1.bf16.msra.mxu0 0
  %4951 = vmatprep.subr.bf16.mxu0 0
  %4952 = vmatpush1.bf16.msra.mxu0 0
  %4953 = vmatprep.subr.bf16.mxu0 0
  %4954 = vmatpush1.bf16.msra.mxu0 0
  %4955 = vmatprep.subr.bf16.mxu0 0
  %4956 = vmatpush1.bf16.msra.mxu0 0
  %4957 = vmatprep.subr.bf16.mxu0 0
  %4958 = vmatpush1.bf16.msra.mxu0 0
  %4959 = vmatprep.subr.bf16.mxu0 0
  %4960 = vmatpush1.bf16.msra.mxu0 0
  %4961 = vmatprep.subr.bf16.mxu0 0
  %4962 = vmatpush1.bf16.msra.mxu0 0
  %4963 = vmatprep.subr.bf16.mxu0 0
  %4964 = vmatpush1.bf16.msra.mxu0 0
  %4965 = vmatprep.subr.bf16.mxu0 0
  %4966 = vmatpush1.bf16.msra.mxu0 0
  %4967 = vmatprep.subr.bf16.mxu0 0
  %4968 = vmatpush1.bf16.msra.mxu0 0
  %4969 = vmatprep.subr.bf16.mxu0 0
  %4970 = vmatpush1.bf16.msra.mxu0 0
  %4971 = vmatprep.subr.bf16.mxu0 0
  %4972 = vmatpush1.bf16.msra.mxu0 0
  %4973 = vmatprep.subr.bf16.mxu0 0
  %4974 = vmatpush1.bf16.msra.mxu0 0
  %4975 = vmatprep.subr.bf16.mxu0 0
  %4976 = vmatpush1.bf16.msra.mxu0 0
  %4977 = vmatprep.mubr.bf16.mxu0 0
  %4978 = vmatmul.mubr.bf16.gmra.mrb[0].mxu0 %v4919
  %v4979 = vpop.f32.mrb[0].mxu0
  %v4980 = vadd.f32 0.0, %v4979
  %v4981 = vpop.f32.mrb[0].mxu0
  %v4982 = vadd.f32 0.0, %v4981
  %v4983 = vpop.f32.mrb[0].mxu0
  %v4984 = vpop.f32.mrb[0].mxu0
  %4985 = vdwg.mxu0
  %4986 = vmatprep.subr.bf16.mxu0 %v4931
  %4987 = vmatpush1.bf16.msra.mxu0 %v4928
  %4988 = vmatprep.subr.bf16.mxu0 0
  %4989 = vmatpush1.bf16.msra.mxu0 0
  %4990 = vmatprep.subr.bf16.mxu0 0
  %4991 = vmatpush1.bf16.msra.mxu0 0
  %4992 = vmatprep.subr.bf16.mxu0 0
  %4993 = vmatpush1.bf16.msra.mxu0 0
  %4994 = vmatprep.subr.bf16.mxu0 0
  %4995 = vmatpush1.bf16.msra.mxu0 0
  %4996 = vmatprep.subr.bf16.mxu0 0
  %4997 = vmatpush1.bf16.msra.mxu0 0
  %4998 = vmatprep.subr.bf16.mxu0 0
  %4999 = vmatpush1.bf16.msra.mxu0 0
  %5000 = vmatprep.subr.bf16.mxu0 0
  %5001 = vmatpush1.bf16.msra.mxu0 0
  %5002 = vmatprep.subr.bf16.mxu0 0
  %5003 = vmatpush1.bf16.msra.mxu0 0
  %5004 = vmatprep.subr.bf16.mxu0 0
  %5005 = vmatpush1.bf16.msra.mxu0 0
  %5006 = vmatprep.subr.bf16.mxu0 0
  %5007 = vmatpush1.bf16.msra.mxu0 0
  %5008 = vmatprep.subr.bf16.mxu0 0
  %5009 = vmatpush1.bf16.msra.mxu0 0
  %5010 = vmatprep.subr.bf16.mxu0 0
  %5011 = vmatpush1.bf16.msra.mxu0 0
  %5012 = vmatprep.subr.bf16.mxu0 0
  %5013 = vmatpush1.bf16.msra.mxu0 0
  %5014 = vmatprep.subr.bf16.mxu0 0
  %5015 = vmatpush1.bf16.msra.mxu0 0
  %5016 = vmatprep.subr.bf16.mxu0 0
  %5017 = vmatpush1.bf16.msra.mxu0 0
  %5018 = vmatprep.mubr.bf16.mxu0 0
  %5019 = vmatmul.mubr.bf16.gmra.mrb[0].mxu0 %v4919
  %v5020 = vpop.f32.mrb[0].mxu0
  %v5021 = vadd.f32 0.0, %v5020
  %v5022 = vpop.f32.mrb[0].mxu0
  %v5023 = vadd.f32 0.0, %v5022
  %v5024 = vpop.f32.mrb[0].mxu0
  %v5025 = vpop.f32.mrb[0].mxu0
  %5026 = vdwg.mxu0
  %5027 = vmatprep.subr.bf16.mxu0 %v4937
  %5028 = vmatpush1.bf16.msra.mxu0 %v4934
  %5029 = vmatprep.subr.bf16.mxu0 0
  %5030 = vmatpush1.bf16.msra.mxu0 0
  %5031 = vmatprep.subr.bf16.mxu0 0
  %5032 = vmatpush1.bf16.msra.mxu0 0
  %5033 = vmatprep.subr.bf16.mxu0 0
  %5034 = vmatpush1.bf16.msra.mxu0 0
  %5035 = vmatprep.subr.bf16.mxu0 0
  %5036 = vmatpush1.bf16.msra.mxu0 0
  %5037 = vmatprep.subr.bf16.mxu0 0
  %5038 = vmatpush1.bf16.msra.mxu0 0
  %5039 = vmatprep.subr.bf16.mxu0 0
  %5040 = vmatpush1.bf16.msra.mxu0 0
  %5041 = vmatprep.subr.bf16.mxu0 0
  %5042 = vmatpush1.bf16.msra.mxu0 0
  %5043 = vmatprep.subr.bf16.mxu0 0
  %5044 = vmatpush1.bf16.msra.mxu0 0
  %5045 = vmatprep.subr.bf16.mxu0 0
  %5046 = vmatpush1.bf16.msra.mxu0 0
  %5047 = vmatprep.subr.bf16.mxu0 0
  %5048 = vmatpush1.bf16.msra.mxu0 0
  %5049 = vmatprep.subr.bf16.mxu0 0
  %5050 = vmatpush1.bf16.msra.mxu0 0
  %5051 = vmatprep.subr.bf16.mxu0 0
  %5052 = vmatpush1.bf16.msra.mxu0 0
  %5053 = vmatprep.subr.bf16.mxu0 0
  %5054 = vmatpush1.bf16.msra.mxu0 0
  %5055 = vmatprep.subr.bf16.mxu0 0
  %5056 = vmatpush1.bf16.msra.mxu0 0
  %5057 = vmatprep.subr.bf16.mxu0 0
  %5058 = vmatpush1.bf16.msra.mxu0 0
  %5059 = vmatprep.mubr.bf16.mxu0 0
  %5060 = vmatmul.mubr.bf16.gmra.mrb[0].mxu0 %v4919
  %v5061 = vpop.f32.mrb[0].mxu0
  %v5062 = vadd.f32 0.0, %v5061
  %v5063 = vpop.f32.mrb[0].mxu0
  %v5064 = vadd.f32 0.0, %v5063
  %v5065 = vpop.f32.mrb[0].mxu0
  %v5066 = vpop.f32.mrb[0].mxu0
  %5067 = vdwg.mxu0
  %5068 = vmatprep.subr.bf16.mxu0 %v4943
  %5069 = vmatpush1.bf16.msra.mxu0 %v4940
  %5070 = vmatprep.subr.bf16.mxu0 0
  %5071 = vmatpush1.bf16.msra.mxu0 0
  %5072 = vmatprep.subr.bf16.mxu0 0
  %5073 = vmatpush1.bf16.msra.mxu0 0
  %5074 = vmatprep.subr.bf16.mxu0 0
  %5075 = vmatpush1.bf16.msra.mxu0 0
  %5076 = vmatprep.subr.bf16.mxu0 0
  %5077 = vmatpush1.bf16.msra.mxu0 0
  %5078 = vmatprep.subr.bf16.mxu0 0
  %5079 = vmatpush1.bf16.msra.mxu0 0
  %5080 = vmatprep.subr.bf16.mxu0 0
  %5081 = vmatpush1.bf16.msra.mxu0 0
  %5082 = vmatprep.subr.bf16.mxu0 0
  %5083 = vmatpush1.bf16.msra.mxu0 0
  %5084 = vmatprep.subr.bf16.mxu0 0
  %5085 = vmatpush1.bf16.msra.mxu0 0
  %5086 = vmatprep.subr.bf16.mxu0 0
  %5087 = vmatpush1.bf16.msra.mxu0 0
  %5088 = vmatprep.subr.bf16.mxu0 0
  %5089 = vmatpush1.bf16.msra.mxu0 0
  %5090 = vmatprep.subr.bf16.mxu0 0
  %5091 = vmatpush1.bf16.msra.mxu0 0
  %5092 = vmatprep.subr.bf16.mxu0 0
  %5093 = vmatpush1.bf16.msra.mxu0 0
  %5094 = vmatprep.subr.bf16.mxu0 0
  %5095 = vmatpush1.bf16.msra.mxu0 0
  %5096 = vmatprep.subr.bf16.mxu0 0
  %5097 = vmatpush1.bf16.msra.mxu0 0
  %5098 = vmatprep.subr.bf16.mxu0 0
  %5099 = vmatpush1.bf16.msra.mxu0 0
  %5100 = vmatprep.mubr.bf16.mxu0 0
  %5101 = vmatmul.mubr.bf16.gmra.mrb[0].mxu0 %v4919
  %v5102 = vpop.f32.mrb[0].mxu0
  %v5103 = vadd.f32 0.0, %v5102
  %v5104 = vpop.f32.mrb[0].mxu0
  %v5105 = vadd.f32 0.0, %v5104
  %v5106 = vpop.f32.mrb[0].mxu0
  %v5107 = vpop.f32.mrb[0].mxu0
  %5108 = vdwg.mxu0
  %v5109 = vadd.f32 %v4883, %v4980
  %v5110 = vadd.f32 %v4884, %v4982
  %v5111 = vadd.f32 %v4885, %v5021
  %v5112 = vadd.f32 %v4886, %v5023
  %v5113 = vadd.f32 %v4887, %v5062
  %v5114 = vadd.f32 %v4888, %v5064
  %v5115 = vadd.f32 %v4889, %v5103
  %v5116 = vadd.f32 %v4890, %v5105
  %5117 = vrot.lane.b32.xlu0 %v3300, 28
  %v5118 = vpop.permute.xlu0 %5117
  %5119 = vrot.lane.b32.xlu0 %v3301, 28
  %v5120 = vpop.permute.xlu0 %5119
  %5121 = vrot.lane.b32.xlu0 %v3302, 28
  %v5122 = vpop.permute.xlu0 %5121
  %5123 = vrot.lane.b32.xlu0 %v3303, 28
  %v5124 = vpop.permute.xlu0 %5123
  %5125 = vrot.lane.b32.xlu0 %v3304, 28
  %v5126 = vpop.permute.xlu0 %5125
  %5127 = vrot.lane.b32.xlu0 %v3305, 28
  %v5128 = vpop.permute.xlu0 %5127
  %5129 = vrot.lane.b32.xlu0 %v3306, 28
  %v5130 = vpop.permute.xlu0 %5129
  %5131 = vrot.lane.b32.xlu0 %v3307, 28
  %v5132 = vpop.permute.xlu0 %5131
  %5133 = vrot.lane.b32.xlu0 %v3308, 28
  %v5134 = vpop.permute.xlu0 %5133
  %vm5135 = vcmask 228352
  %v5136 = vsel %vm5135, %v5118, %v5120
  %v5137 = vsel %vm5135, %v5120, %v5122
  %v5138 = vsel %vm5135, %v5122, %v5124
  %v5139 = vsel %vm5135, %v5124, %v5126
  %v5140 = vsel %vm5135, %v5126, %v5128
  %v5141 = vsel %vm5135, %v5128, %v5130
  %v5142 = vsel %vm5135, %v5130, %v5132
  %v5143 = vsel %vm5135, %v5132, %v5134
  %v5145 = vsel %vm161, %v101, 0
  %v5148 = vsel %vm165, %v5136, 0
  %v5151 = vsel %vm165, %v5137, 0
  %v5154 = vsel %vm165, %v5138, 0
  %v5157 = vsel %vm165, %v5139, 0
  %v5160 = vsel %vm165, %v5140, 0
  %v5163 = vsel %vm165, %v5141, 0
  %v5166 = vsel %vm165, %v5142, 0
  %v5169 = vsel %vm165, %v5143, 0
  %5171 = vmatprep.subr.bf16.mxu0 %v5151
  %5172 = vmatpush1.bf16.msra.mxu0 %v5148
  %5173 = vmatprep.subr.bf16.mxu0 0
  %5174 = vmatpush1.bf16.msra.mxu0 0
  %5175 = vmatprep.subr.bf16.mxu0 0
  %5176 = vmatpush1.bf16.msra.mxu0 0
  %5177 = vmatprep.subr.bf16.mxu0 0
  %5178 = vmatpush1.bf16.msra.mxu0 0
  %5179 = vmatprep.subr.bf16.mxu0 0
  %5180 = vmatpush1.bf16.msra.mxu0 0
  %5181 = vmatprep.subr.bf16.mxu0 0
  %5182 = vmatpush1.bf16.msra.mxu0 0
  %5183 = vmatprep.subr.bf16.mxu0 0
  %5184 = vmatpush1.bf16.msra.mxu0 0
  %5185 = vmatprep.subr.bf16.mxu0 0
  %5186 = vmatpush1.bf16.msra.mxu0 0
  %5187 = vmatprep.subr.bf16.mxu0 0
  %5188 = vmatpush1.bf16.msra.mxu0 0
  %5189 = vmatprep.subr.bf16.mxu0 0
  %5190 = vmatpush1.bf16.msra.mxu0 0
  %5191 = vmatprep.subr.bf16.mxu0 0
  %5192 = vmatpush1.bf16.msra.mxu0 0
  %5193 = vmatprep.subr.bf16.mxu0 0
  %5194 = vmatpush1.bf16.msra.mxu0 0
  %5195 = vmatprep.subr.bf16.mxu0 0
  %5196 = vmatpush1.bf16.msra.mxu0 0
  %5197 = vmatprep.subr.bf16.mxu0 0
  %5198 = vmatpush1.bf16.msra.mxu0 0
  %5199 = vmatprep.subr.bf16.mxu0 0
  %5200 = vmatpush1.bf16.msra.mxu0 0
  %5201 = vmatprep.subr.bf16.mxu0 0
  %5202 = vmatpush1.bf16.msra.mxu0 0
  %5203 = vmatprep.mubr.bf16.mxu0 0
  %5204 = vmatmul.mubr.bf16.gmra.mrb[0].mxu0 %v5145
  %v5205 = vpop.f32.mrb[0].mxu0
  %v5206 = vadd.f32 0.0, %v5205
  %v5207 = vpop.f32.mrb[0].mxu0
  %v5208 = vadd.f32 0.0, %v5207
  %v5209 = vpop.f32.mrb[0].mxu0
  %v5210 = vpop.f32.mrb[0].mxu0
  %5211 = vdwg.mxu0
  %5212 = vmatprep.subr.bf16.mxu0 %v5157
  %5213 = vmatpush1.bf16.msra.mxu0 %v5154
  %5214 = vmatprep.subr.bf16.mxu0 0
  %5215 = vmatpush1.bf16.msra.mxu0 0
  %5216 = vmatprep.subr.bf16.mxu0 0
  %5217 = vmatpush1.bf16.msra.mxu0 0
  %5218 = vmatprep.subr.bf16.mxu0 0
  %5219 = vmatpush1.bf16.msra.mxu0 0
  %5220 = vmatprep.subr.bf16.mxu0 0
  %5221 = vmatpush1.bf16.msra.mxu0 0
  %5222 = vmatprep.subr.bf16.mxu0 0
  %5223 = vmatpush1.bf16.msra.mxu0 0
  %5224 = vmatprep.subr.bf16.mxu0 0
  %5225 = vmatpush1.bf16.msra.mxu0 0
  %5226 = vmatprep.subr.bf16.mxu0 0
  %5227 = vmatpush1.bf16.msra.mxu0 0
  %5228 = vmatprep.subr.bf16.mxu0 0
  %5229 = vmatpush1.bf16.msra.mxu0 0
  %5230 = vmatprep.subr.bf16.mxu0 0
  %5231 = vmatpush1.bf16.msra.mxu0 0
  %5232 = vmatprep.subr.bf16.mxu0 0
  %5233 = vmatpush1.bf16.msra.mxu0 0
  %5234 = vmatprep.subr.bf16.mxu0 0
  %5235 = vmatpush1.bf16.msra.mxu0 0
  %5236 = vmatprep.subr.bf16.mxu0 0
  %5237 = vmatpush1.bf16.msra.mxu0 0
  %5238 = vmatprep.subr.bf16.mxu0 0
  %5239 = vmatpush1.bf16.msra.mxu0 0
  %5240 = vmatprep.subr.bf16.mxu0 0
  %5241 = vmatpush1.bf16.msra.mxu0 0
  %5242 = vmatprep.subr.bf16.mxu0 0
  %5243 = vmatpush1.bf16.msra.mxu0 0
  %5244 = vmatprep.mubr.bf16.mxu0 0
  %5245 = vmatmul.mubr.bf16.gmra.mrb[0].mxu0 %v5145
  %v5246 = vpop.f32.mrb[0].mxu0
  %v5247 = vadd.f32 0.0, %v5246
  %v5248 = vpop.f32.mrb[0].mxu0
  %v5249 = vadd.f32 0.0, %v5248
  %v5250 = vpop.f32.mrb[0].mxu0
  %v5251 = vpop.f32.mrb[0].mxu0
  %5252 = vdwg.mxu0
  %5253 = vmatprep.subr.bf16.mxu0 %v5163
  %5254 = vmatpush1.bf16.msra.mxu0 %v5160
  %5255 = vmatprep.subr.bf16.mxu0 0
  %5256 = vmatpush1.bf16.msra.mxu0 0
  %5257 = vmatprep.subr.bf16.mxu0 0
  %5258 = vmatpush1.bf16.msra.mxu0 0
  %5259 = vmatprep.subr.bf16.mxu0 0
  %5260 = vmatpush1.bf16.msra.mxu0 0
  %5261 = vmatprep.subr.bf16.mxu0 0
  %5262 = vmatpush1.bf16.msra.mxu0 0
  %5263 = vmatprep.subr.bf16.mxu0 0
  %5264 = vmatpush1.bf16.msra.mxu0 0
  %5265 = vmatprep.subr.bf16.mxu0 0
  %5266 = vmatpush1.bf16.msra.mxu0 0
  %5267 = vmatprep.subr.bf16.mxu0 0
  %5268 = vmatpush1.bf16.msra.mxu0 0
  %5269 = vmatprep.subr.bf16.mxu0 0
  %5270 = vmatpush1.bf16.msra.mxu0 0
  %5271 = vmatprep.subr.bf16.mxu0 0
  %5272 = vmatpush1.bf16.msra.mxu0 0
  %5273 = vmatprep.subr.bf16.mxu0 0
  %5274 = vmatpush1.bf16.msra.mxu0 0
  %5275 = vmatprep.subr.bf16.mxu0 0
  %5276 = vmatpush1.bf16.msra.mxu0 0
  %5277 = vmatprep.subr.bf16.mxu0 0
  %5278 = vmatpush1.bf16.msra.mxu0 0
  %5279 = vmatprep.subr.bf16.mxu0 0
  %5280 = vmatpush1.bf16.msra.mxu0 0
  %5281 = vmatprep.subr.bf16.mxu0 0
  %5282 = vmatpush1.bf16.msra.mxu0 0
  %5283 = vmatprep.subr.bf16.mxu0 0
  %5284 = vmatpush1.bf16.msra.mxu0 0
  %5285 = vmatprep.mubr.bf16.mxu0 0
  %5286 = vmatmul.mubr.bf16.gmra.mrb[0].mxu0 %v5145
  %v5287 = vpop.f32.mrb[0].mxu0
  %v5288 = vadd.f32 0.0, %v5287
  %v5289 = vpop.f32.mrb[0].mxu0
  %v5290 = vadd.f32 0.0, %v5289
  %v5291 = vpop.f32.mrb[0].mxu0
  %v5292 = vpop.f32.mrb[0].mxu0
  %5293 = vdwg.mxu0
  %5294 = vmatprep.subr.bf16.mxu0 %v5169
  %5295 = vmatpush1.bf16.msra.mxu0 %v5166
  %5296 = vmatprep.subr.bf16.mxu0 0
  %5297 = vmatpush1.bf16.msra.mxu0 0
  %5298 = vmatprep.subr.bf16.mxu0 0
  %5299 = vmatpush1.bf16.msra.mxu0 0
  %5300 = vmatprep.subr.bf16.mxu0 0
  %5301 = vmatpush1.bf16.msra.mxu0 0
  %5302 = vmatprep.subr.bf16.mxu0 0
  %5303 = vmatpush1.bf16.msra.mxu0 0
  %5304 = vmatprep.subr.bf16.mxu0 0
  %5305 = vmatpush1.bf16.msra.mxu0 0
  %5306 = vmatprep.subr.bf16.mxu0 0
  %5307 = vmatpush1.bf16.msra.mxu0 0
  %5308 = vmatprep.subr.bf16.mxu0 0
  %5309 = vmatpush1.bf16.msra.mxu0 0
  %5310 = vmatprep.subr.bf16.mxu0 0
  %5311 = vmatpush1.bf16.msra.mxu0 0
  %5312 = vmatprep.subr.bf16.mxu0 0
  %5313 = vmatpush1.bf16.msra.mxu0 0
  %5314 = vmatprep.subr.bf16.mxu0 0
  %5315 = vmatpush1.bf16.msra.mxu0 0
  %5316 = vmatprep.subr.bf16.mxu0 0
  %5317 = vmatpush1.bf16.msra.mxu0 0
  %5318 = vmatprep.subr.bf16.mxu0 0
  %5319 = vmatpush1.bf16.msra.mxu0 0
  %5320 = vmatprep.subr.bf16.mxu0 0
  %5321 = vmatpush1.bf16.msra.mxu0 0
  %5322 = vmatprep.subr.bf16.mxu0 0
  %5323 = vmatpush1.bf16.msra.mxu0 0
  %5324 = vmatprep.subr.bf16.mxu0 0
  %5325 = vmatpush1.bf16.msra.mxu0 0
  %5326 = vmatprep.mubr.bf16.mxu0 0
  %5327 = vmatmul.mubr.bf16.gmra.mrb[0].mxu0 %v5145
  %v5328 = vpop.f32.mrb[0].mxu0
  %v5329 = vadd.f32 0.0, %v5328
  %v5330 = vpop.f32.mrb[0].mxu0
  %v5331 = vadd.f32 0.0, %v5330
  %v5332 = vpop.f32.mrb[0].mxu0
  %v5333 = vpop.f32.mrb[0].mxu0
  %5334 = vdwg.mxu0
  %v5335 = vadd.f32 %v5109, %v5206
  %v5336 = vadd.f32 %v5110, %v5208
  %v5337 = vadd.f32 %v5111, %v5247
  %v5338 = vadd.f32 %v5112, %v5249
  %v5339 = vadd.f32 %v5113, %v5288
  %v5340 = vadd.f32 %v5114, %v5290
  %v5341 = vadd.f32 %v5115, %v5329
  %v5342 = vadd.f32 %v5116, %v5331
  %5343 = vrot.lane.b32.xlu0 %v3300, 27
  %v5344 = vpop.permute.xlu0 %5343
  %5345 = vrot.lane.b32.xlu0 %v3301, 27
  %v5346 = vpop.permute.xlu0 %5345
  %5347 = vrot.lane.b32.xlu0 %v3302, 27
  %v5348 = vpop.permute.xlu0 %5347
  %5349 = vrot.lane.b32.xlu0 %v3303, 27
  %v5350 = vpop.permute.xlu0 %5349
  %5351 = vrot.lane.b32.xlu0 %v3304, 27
  %v5352 = vpop.permute.xlu0 %5351
  %5353 = vrot.lane.b32.xlu0 %v3305, 27
  %v5354 = vpop.permute.xlu0 %5353
  %5355 = vrot.lane.b32.xlu0 %v3306, 27
  %v5356 = vpop.permute.xlu0 %5355
  %5357 = vrot.lane.b32.xlu0 %v3307, 27
  %v5358 = vpop.permute.xlu0 %5357
  %5359 = vrot.lane.b32.xlu0 %v3308, 27
  %v5360 = vpop.permute.xlu0 %5359
  %vm5361 = vcmask 220160
  %v5362 = vsel %vm5361, %v5344, %v5346
  %v5363 = vsel %vm5361, %v5346, %v5348
  %v5364 = vsel %vm5361, %v5348, %v5350
  %v5365 = vsel %vm5361, %v5350, %v5352
  %v5366 = vsel %vm5361, %v5352, %v5354
  %v5367 = vsel %vm5361, %v5354, %v5356
  %v5368 = vsel %vm5361, %v5356, %v5358
  %v5369 = vsel %vm5361, %v5358, %v5360
  %v5371 = vsel %vm161, %v102, 0
  %v5374 = vsel %vm165, %v5362, 0
  %v5377 = vsel %vm165, %v5363, 0
  %v5380 = vsel %vm165, %v5364, 0
  %v5383 = vsel %vm165, %v5365, 0
  %v5386 = vsel %vm165, %v5366, 0
  %v5389 = vsel %vm165, %v5367, 0
  %v5392 = vsel %vm165, %v5368, 0
  %v5395 = vsel %vm165, %v5369, 0
  %5397 = vmatprep.subr.bf16.mxu0 %v5377
  %5398 = vmatpush1.bf16.msra.mxu0 %v5374
  %5399 = vmatprep.subr.bf16.mxu0 0
  %5400 = vmatpush1.bf16.msra.mxu0 0
  %5401 = vmatprep.subr.bf16.mxu0 0
  %5402 = vmatpush1.bf16.msra.mxu0 0
  %5403 = vmatprep.subr.bf16.mxu0 0
  %5404 = vmatpush1.bf16.msra.mxu0 0
  %5405 = vmatprep.subr.bf16.mxu0 0
  %5406 = vmatpush1.bf16.msra.mxu0 0
  %5407 = vmatprep.subr.bf16.mxu0 0
  %5408 = vmatpush1.bf16.msra.mxu0 0
  %5409 = vmatprep.subr.bf16.mxu0 0
  %5410 = vmatpush1.bf16.msra.mxu0 0
  %5411 = vmatprep.subr.bf16.mxu0 0
  %5412 = vmatpush1.bf16.msra.mxu0 0
  %5413 = vmatprep.subr.bf16.mxu0 0
  %5414 = vmatpush1.bf16.msra.mxu0 0
  %5415 = vmatprep.subr.bf16.mxu0 0
  %5416 = vmatpush1.bf16.msra.mxu0 0
  %5417 = vmatprep.subr.bf16.mxu0 0
  %5418 = vmatpush1.bf16.msra.mxu0 0
  %5419 = vmatprep.subr.bf16.mxu0 0
  %5420 = vmatpush1.bf16.msra.mxu0 0
  %5421 = vmatprep.subr.bf16.mxu0 0
  %5422 = vmatpush1.bf16.msra.mxu0 0
  %5423 = vmatprep.subr.bf16.mxu0 0
  %5424 = vmatpush1.bf16.msra.mxu0 0
  %5425 = vmatprep.subr.bf16.mxu0 0
  %5426 = vmatpush1.bf16.msra.mxu0 0
  %5427 = vmatprep.subr.bf16.mxu0 0
  %5428 = vmatpush1.bf16.msra.mxu0 0
  %5429 = vmatprep.mubr.bf16.mxu0 0
  %5430 = vmatmul.mubr.bf16.gmra.mrb[0].mxu0 %v5371
  %v5431 = vpop.f32.mrb[0].mxu0
  %v5432 = vadd.f32 0.0, %v5431
  %v5433 = vpop.f32.mrb[0].mxu0
  %v5434 = vadd.f32 0.0, %v5433
  %v5435 = vpop.f32.mrb[0].mxu0
  %v5436 = vpop.f32.mrb[0].mxu0
  %5437 = vdwg.mxu0
  %5438 = vmatprep.subr.bf16.mxu0 %v5383
  %5439 = vmatpush1.bf16.msra.mxu0 %v5380
  %5440 = vmatprep.subr.bf16.mxu0 0
  %5441 = vmatpush1.bf16.msra.mxu0 0
  %5442 = vmatprep.subr.bf16.mxu0 0
  %5443 = vmatpush1.bf16.msra.mxu0 0
  %5444 = vmatprep.subr.bf16.mxu0 0
  %5445 = vmatpush1.bf16.msra.mxu0 0
  %5446 = vmatprep.subr.bf16.mxu0 0
  %5447 = vmatpush1.bf16.msra.mxu0 0
  %5448 = vmatprep.subr.bf16.mxu0 0
  %5449 = vmatpush1.bf16.msra.mxu0 0
  %5450 = vmatprep.subr.bf16.mxu0 0
  %5451 = vmatpush1.bf16.msra.mxu0 0
  %5452 = vmatprep.subr.bf16.mxu0 0
  %5453 = vmatpush1.bf16.msra.mxu0 0
  %5454 = vmatprep.subr.bf16.mxu0 0
  %5455 = vmatpush1.bf16.msra.mxu0 0
  %5456 = vmatprep.subr.bf16.mxu0 0
  %5457 = vmatpush1.bf16.msra.mxu0 0
  %5458 = vmatprep.subr.bf16.mxu0 0
  %5459 = vmatpush1.bf16.msra.mxu0 0
  %5460 = vmatprep.subr.bf16.mxu0 0
  %5461 = vmatpush1.bf16.msra.mxu0 0
  %5462 = vmatprep.subr.bf16.mxu0 0
  %5463 = vmatpush1.bf16.msra.mxu0 0
  %5464 = vmatprep.subr.bf16.mxu0 0
  %5465 = vmatpush1.bf16.msra.mxu0 0
  %5466 = vmatprep.subr.bf16.mxu0 0
  %5467 = vmatpush1.bf16.msra.mxu0 0
  %5468 = vmatprep.subr.bf16.mxu0 0
  %5469 = vmatpush1.bf16.msra.mxu0 0
  %5470 = vmatprep.mubr.bf16.mxu0 0
  %5471 = vmatmul.mubr.bf16.gmra.mrb[0].mxu0 %v5371
  %v5472 = vpop.f32.mrb[0].mxu0
  %v5473 = vadd.f32 0.0, %v5472
  %v5474 = vpop.f32.mrb[0].mxu0
  %v5475 = vadd.f32 0.0, %v5474
  %v5476 = vpop.f32.mrb[0].mxu0
  %v5477 = vpop.f32.mrb[0].mxu0
  %5478 = vdwg.mxu0
  %5479 = vmatprep.subr.bf16.mxu0 %v5389
  %5480 = vmatpush1.bf16.msra.mxu0 %v5386
  %5481 = vmatprep.subr.bf16.mxu0 0
  %5482 = vmatpush1.bf16.msra.mxu0 0
  %5483 = vmatprep.subr.bf16.mxu0 0
  %5484 = vmatpush1.bf16.msra.mxu0 0
  %5485 = vmatprep.subr.bf16.mxu0 0
  %5486 = vmatpush1.bf16.msra.mxu0 0
  %5487 = vmatprep.subr.bf16.mxu0 0
  %5488 = vmatpush1.bf16.msra.mxu0 0
  %5489 = vmatprep.subr.bf16.mxu0 0
  %5490 = vmatpush1.bf16.msra.mxu0 0
  %5491 = vmatprep.subr.bf16.mxu0 0
  %5492 = vmatpush1.bf16.msra.mxu0 0
  %5493 = vmatprep.subr.bf16.mxu0 0
  %5494 = vmatpush1.bf16.msra.mxu0 0
  %5495 = vmatprep.subr.bf16.mxu0 0
  %5496 = vmatpush1.bf16.msra.mxu0 0
  %5497 = vmatprep.subr.bf16.mxu0 0
  %5498 = vmatpush1.bf16.msra.mxu0 0
  %5499 = vmatprep.subr.bf16.mxu0 0
  %5500 = vmatpush1.bf16.msra.mxu0 0
  %5501 = vmatprep.subr.bf16.mxu0 0
  %5502 = vmatpush1.bf16.msra.mxu0 0
  %5503 = vmatprep.subr.bf16.mxu0 0
  %5504 = vmatpush1.bf16.msra.mxu0 0
  %5505 = vmatprep.subr.bf16.mxu0 0
  %5506 = vmatpush1.bf16.msra.mxu0 0
  %5507 = vmatprep.subr.bf16.mxu0 0
  %5508 = vmatpush1.bf16.msra.mxu0 0
  %5509 = vmatprep.subr.bf16.mxu0 0
  %5510 = vmatpush1.bf16.msra.mxu0 0
  %5511 = vmatprep.mubr.bf16.mxu0 0
  %5512 = vmatmul.mubr.bf16.gmra.mrb[0].mxu0 %v5371
  %v5513 = vpop.f32.mrb[0].mxu0
  %v5514 = vadd.f32 0.0, %v5513
  %v5515 = vpop.f32.mrb[0].mxu0
  %v5516 = vadd.f32 0.0, %v5515
  %v5517 = vpop.f32.mrb[0].mxu0
  %v5518 = vpop.f32.mrb[0].mxu0
  %5519 = vdwg.mxu0
  %5520 = vmatprep.subr.bf16.mxu0 %v5395
  %5521 = vmatpush1.bf16.msra.mxu0 %v5392
  %5522 = vmatprep.subr.bf16.mxu0 0
  %5523 = vmatpush1.bf16.msra.mxu0 0
  %5524 = vmatprep.subr.bf16.mxu0 0
  %5525 = vmatpush1.bf16.msra.mxu0 0
  %5526 = vmatprep.subr.bf16.mxu0 0
  %5527 = vmatpush1.bf16.msra.mxu0 0
  %5528 = vmatprep.subr.bf16.mxu0 0
  %5529 = vmatpush1.bf16.msra.mxu0 0
  %5530 = vmatprep.subr.bf16.mxu0 0
  %5531 = vmatpush1.bf16.msra.mxu0 0
  %5532 = vmatprep.subr.bf16.mxu0 0
  %5533 = vmatpush1.bf16.msra.mxu0 0
  %5534 = vmatprep.subr.bf16.mxu0 0
  %5535 = vmatpush1.bf16.msra.mxu0 0
  %5536 = vmatprep.subr.bf16.mxu0 0
  %5537 = vmatpush1.bf16.msra.mxu0 0
  %5538 = vmatprep.subr.bf16.mxu0 0
  %5539 = vmatpush1.bf16.msra.mxu0 0
  %5540 = vmatprep.subr.bf16.mxu0 0
  %5541 = vmatpush1.bf16.msra.mxu0 0
  %5542 = vmatprep.subr.bf16.mxu0 0
  %5543 = vmatpush1.bf16.msra.mxu0 0
  %5544 = vmatprep.subr.bf16.mxu0 0
  %5545 = vmatpush1.bf16.msra.mxu0 0
  %5546 = vmatprep.subr.bf16.mxu0 0
  %5547 = vmatpush1.bf16.msra.mxu0 0
  %5548 = vmatprep.subr.bf16.mxu0 0
  %5549 = vmatpush1.bf16.msra.mxu0 0
  %5550 = vmatprep.subr.bf16.mxu0 0
  %5551 = vmatpush1.bf16.msra.mxu0 0
  %5552 = vmatprep.mubr.bf16.mxu0 0
  %5553 = vmatmul.mubr.bf16.gmra.mrb[0].mxu0 %v5371
  %v5554 = vpop.f32.mrb[0].mxu0
  %v5555 = vadd.f32 0.0, %v5554
  %v5556 = vpop.f32.mrb[0].mxu0
  %v5557 = vadd.f32 0.0, %v5556
  %v5558 = vpop.f32.mrb[0].mxu0
  %v5559 = vpop.f32.mrb[0].mxu0
  %5560 = vdwg.mxu0
  %v5561 = vadd.f32 %v5335, %v5432
  %v5562 = vadd.f32 %v5336, %v5434
  %v5563 = vadd.f32 %v5337, %v5473
  %v5564 = vadd.f32 %v5338, %v5475
  %v5565 = vadd.f32 %v5339, %v5514
  %v5566 = vadd.f32 %v5340, %v5516
  %v5567 = vadd.f32 %v5341, %v5555
  %v5568 = vadd.f32 %v5342, %v5557
  %5569 = vrot.lane.b32.xlu0 %v3300, 19
  %v5570 = vpop.permute.xlu0 %5569
  %5571 = vrot.lane.b32.xlu0 %v3301, 19
  %v5572 = vpop.permute.xlu0 %5571
  %5573 = vrot.lane.b32.xlu0 %v3302, 19
  %v5574 = vpop.permute.xlu0 %5573
  %5575 = vrot.lane.b32.xlu0 %v3303, 19
  %v5576 = vpop.permute.xlu0 %5575
  %5577 = vrot.lane.b32.xlu0 %v3304, 19
  %v5578 = vpop.permute.xlu0 %5577
  %5579 = vrot.lane.b32.xlu0 %v3305, 19
  %v5580 = vpop.permute.xlu0 %5579
  %5581 = vrot.lane.b32.xlu0 %v3306, 19
  %v5582 = vpop.permute.xlu0 %5581
  %5583 = vrot.lane.b32.xlu0 %v3307, 19
  %v5584 = vpop.permute.xlu0 %5583
  %5585 = vrot.lane.b32.xlu0 %v3308, 19
  %v5586 = vpop.permute.xlu0 %5585
  %vm5587 = vcmask 154624
  %v5588 = vsel %vm5587, %v5570, %v5572
  %v5589 = vsel %vm5587, %v5572, %v5574
  %v5590 = vsel %vm5587, %v5574, %v5576
  %v5591 = vsel %vm5587, %v5576, %v5578
  %v5592 = vsel %vm5587, %v5578, %v5580
  %v5593 = vsel %vm5587, %v5580, %v5582
  %v5594 = vsel %vm5587, %v5582, %v5584
  %v5595 = vsel %vm5587, %v5584, %v5586
  %v5597 = vsel %vm161, %v103, 0
  %v5600 = vsel %vm165, %v5588, 0
  %v5603 = vsel %vm165, %v5589, 0
  %v5606 = vsel %vm165, %v5590, 0
  %v5609 = vsel %vm165, %v5591, 0
  %v5612 = vsel %vm165, %v5592, 0
  %v5615 = vsel %vm165, %v5593, 0
  %v5618 = vsel %vm165, %v5594, 0
  %v5621 = vsel %vm165, %v5595, 0
  %5623 = vmatprep.subr.bf16.mxu0 %v5603
  %5624 = vmatpush1.bf16.msra.mxu0 %v5600
  %5625 = vmatprep.subr.bf16.mxu0 0
  %5626 = vmatpush1.bf16.msra.mxu0 0
  %5627 = vmatprep.subr.bf16.mxu0 0
  %5628 = vmatpush1.bf16.msra.mxu0 0
  %5629 = vmatprep.subr.bf16.mxu0 0
  %5630 = vmatpush1.bf16.msra.mxu0 0
  %5631 = vmatprep.subr.bf16.mxu0 0
  %5632 = vmatpush1.bf16.msra.mxu0 0
  %5633 = vmatprep.subr.bf16.mxu0 0
  %5634 = vmatpush1.bf16.msra.mxu0 0
  %5635 = vmatprep.subr.bf16.mxu0 0
  %5636 = vmatpush1.bf16.msra.mxu0 0
  %5637 = vmatprep.subr.bf16.mxu0 0
  %5638 = vmatpush1.bf16.msra.mxu0 0
  %5639 = vmatprep.subr.bf16.mxu0 0
  %5640 = vmatpush1.bf16.msra.mxu0 0
  %5641 = vmatprep.subr.bf16.mxu0 0
  %5642 = vmatpush1.bf16.msra.mxu0 0
  %5643 = vmatprep.subr.bf16.mxu0 0
  %5644 = vmatpush1.bf16.msra.mxu0 0
  %5645 = vmatprep.subr.bf16.mxu0 0
  %5646 = vmatpush1.bf16.msra.mxu0 0
  %5647 = vmatprep.subr.bf16.mxu0 0
  %5648 = vmatpush1.bf16.msra.mxu0 0
  %5649 = vmatprep.subr.bf16.mxu0 0
  %5650 = vmatpush1.bf16.msra.mxu0 0
  %5651 = vmatprep.subr.bf16.mxu0 0
  %5652 = vmatpush1.bf16.msra.mxu0 0
  %5653 = vmatprep.subr.bf16.mxu0 0
  %5654 = vmatpush1.bf16.msra.mxu0 0
  %5655 = vmatprep.mubr.bf16.mxu0 0
  %5656 = vmatmul.mubr.bf16.gmra.mrb[0].mxu0 %v5597
  %v5657 = vpop.f32.mrb[0].mxu0
  %v5658 = vadd.f32 0.0, %v5657
  %v5659 = vpop.f32.mrb[0].mxu0
  %v5660 = vadd.f32 0.0, %v5659
  %v5661 = vpop.f32.mrb[0].mxu0
  %v5662 = vpop.f32.mrb[0].mxu0
  %5663 = vdwg.mxu0
  %5664 = vmatprep.subr.bf16.mxu0 %v5609
  %5665 = vmatpush1.bf16.msra.mxu0 %v5606
  %5666 = vmatprep.subr.bf16.mxu0 0
  %5667 = vmatpush1.bf16.msra.mxu0 0
  %5668 = vmatprep.subr.bf16.mxu0 0
  %5669 = vmatpush1.bf16.msra.mxu0 0
  %5670 = vmatprep.subr.bf16.mxu0 0
  %5671 = vmatpush1.bf16.msra.mxu0 0
  %5672 = vmatprep.subr.bf16.mxu0 0
  %5673 = vmatpush1.bf16.msra.mxu0 0
  %5674 = vmatprep.subr.bf16.mxu0 0
  %5675 = vmatpush1.bf16.msra.mxu0 0
  %5676 = vmatprep.subr.bf16.mxu0 0
  %5677 = vmatpush1.bf16.msra.mxu0 0
  %5678 = vmatprep.subr.bf16.mxu0 0
  %5679 = vmatpush1.bf16.msra.mxu0 0
  %5680 = vmatprep.subr.bf16.mxu0 0
  %5681 = vmatpush1.bf16.msra.mxu0 0
  %5682 = vmatprep.subr.bf16.mxu0 0
  %5683 = vmatpush1.bf16.msra.mxu0 0
  %5684 = vmatprep.subr.bf16.mxu0 0
  %5685 = vmatpush1.bf16.msra.mxu0 0
  %5686 = vmatprep.subr.bf16.mxu0 0
  %5687 = vmatpush1.bf16.msra.mxu0 0
  %5688 = vmatprep.subr.bf16.mxu0 0
  %5689 = vmatpush1.bf16.msra.mxu0 0
  %5690 = vmatprep.subr.bf16.mxu0 0
  %5691 = vmatpush1.bf16.msra.mxu0 0
  %5692 = vmatprep.subr.bf16.mxu0 0
  %5693 = vmatpush1.bf16.msra.mxu0 0
  %5694 = vmatprep.subr.bf16.mxu0 0
  %5695 = vmatpush1.bf16.msra.mxu0 0
  %5696 = vmatprep.mubr.bf16.mxu0 0
  %5697 = vmatmul.mubr.bf16.gmra.mrb[0].mxu0 %v5597
  %v5698 = vpop.f32.mrb[0].mxu0
  %v5699 = vadd.f32 0.0, %v5698
  %v5700 = vpop.f32.mrb[0].mxu0
  %v5701 = vadd.f32 0.0, %v5700
  %v5702 = vpop.f32.mrb[0].mxu0
  %v5703 = vpop.f32.mrb[0].mxu0
  %5704 = vdwg.mxu0
  %5705 = vmatprep.subr.bf16.mxu0 %v5615
  %5706 = vmatpush1.bf16.msra.mxu0 %v5612
  %5707 = vmatprep.subr.bf16.mxu0 0
  %5708 = vmatpush1.bf16.msra.mxu0 0
  %5709 = vmatprep.subr.bf16.mxu0 0
  %5710 = vmatpush1.bf16.msra.mxu0 0
  %5711 = vmatprep.subr.bf16.mxu0 0
  %5712 = vmatpush1.bf16.msra.mxu0 0
  %5713 = vmatprep.subr.bf16.mxu0 0
  %5714 = vmatpush1.bf16.msra.mxu0 0
  %5715 = vmatprep.subr.bf16.mxu0 0
  %5716 = vmatpush1.bf16.msra.mxu0 0
  %5717 = vmatprep.subr.bf16.mxu0 0
  %5718 = vmatpush1.bf16.msra.mxu0 0
  %5719 = vmatprep.subr.bf16.mxu0 0
  %5720 = vmatpush1.bf16.msra.mxu0 0
  %5721 = vmatprep.subr.bf16.mxu0 0
  %5722 = vmatpush1.bf16.msra.mxu0 0
  %5723 = vmatprep.subr.bf16.mxu0 0
  %5724 = vmatpush1.bf16.msra.mxu0 0
  %5725 = vmatprep.subr.bf16.mxu0 0
  %5726 = vmatpush1.bf16.msra.mxu0 0
  %5727 = vmatprep.subr.bf16.mxu0 0
  %5728 = vmatpush1.bf16.msra.mxu0 0
  %5729 = vmatprep.subr.bf16.mxu0 0
  %5730 = vmatpush1.bf16.msra.mxu0 0
  %5731 = vmatprep.subr.bf16.mxu0 0
  %5732 = vmatpush1.bf16.msra.mxu0 0
  %5733 = vmatprep.subr.bf16.mxu0 0
  %5734 = vmatpush1.bf16.msra.mxu0 0
  %5735 = vmatprep.subr.bf16.mxu0 0
  %5736 = vmatpush1.bf16.msra.mxu0 0
  %5737 = vmatprep.mubr.bf16.mxu0 0
  %5738 = vmatmul.mubr.bf16.gmra.mrb[0].mxu0 %v5597
  %v5739 = vpop.f32.mrb[0].mxu0
  %v5740 = vadd.f32 0.0, %v5739
  %v5741 = vpop.f32.mrb[0].mxu0
  %v5742 = vadd.f32 0.0, %v5741
  %v5743 = vpop.f32.mrb[0].mxu0
  %v5744 = vpop.f32.mrb[0].mxu0
  %5745 = vdwg.mxu0
  %5746 = vmatprep.subr.bf16.mxu0 %v5621
  %5747 = vmatpush1.bf16.msra.mxu0 %v5618
  %5748 = vmatprep.subr.bf16.mxu0 0
  %5749 = vmatpush1.bf16.msra.mxu0 0
  %5750 = vmatprep.subr.bf16.mxu0 0
  %5751 = vmatpush1.bf16.msra.mxu0 0
  %5752 = vmatprep.subr.bf16.mxu0 0
  %5753 = vmatpush1.bf16.msra.mxu0 0
  %5754 = vmatprep.subr.bf16.mxu0 0
  %5755 = vmatpush1.bf16.msra.mxu0 0
  %5756 = vmatprep.subr.bf16.mxu0 0
  %5757 = vmatpush1.bf16.msra.mxu0 0
  %5758 = vmatprep.subr.bf16.mxu0 0
  %5759 = vmatpush1.bf16.msra.mxu0 0
  %5760 = vmatprep.subr.bf16.mxu0 0
  %5761 = vmatpush1.bf16.msra.mxu0 0
  %5762 = vmatprep.subr.bf16.mxu0 0
  %5763 = vmatpush1.bf16.msra.mxu0 0
  %5764 = vmatprep.subr.bf16.mxu0 0
  %5765 = vmatpush1.bf16.msra.mxu0 0
  %5766 = vmatprep.subr.bf16.mxu0 0
  %5767 = vmatpush1.bf16.msra.mxu0 0
  %5768 = vmatprep.subr.bf16.mxu0 0
  %5769 = vmatpush1.bf16.msra.mxu0 0
  %5770 = vmatprep.subr.bf16.mxu0 0
  %5771 = vmatpush1.bf16.msra.mxu0 0
  %5772 = vmatprep.subr.bf16.mxu0 0
  %5773 = vmatpush1.bf16.msra.mxu0 0
  %5774 = vmatprep.subr.bf16.mxu0 0
  %5775 = vmatpush1.bf16.msra.mxu0 0
  %5776 = vmatprep.subr.bf16.mxu0 0
  %5777 = vmatpush1.bf16.msra.mxu0 0
  %5778 = vmatprep.mubr.bf16.mxu0 0
  %5779 = vmatmul.mubr.bf16.gmra.mrb[0].mxu0 %v5597
  %v5780 = vpop.f32.mrb[0].mxu0
  %v5781 = vadd.f32 0.0, %v5780
  %v5782 = vpop.f32.mrb[0].mxu0
  %v5783 = vadd.f32 0.0, %v5782
  %v5784 = vpop.f32.mrb[0].mxu0
  %v5785 = vpop.f32.mrb[0].mxu0
  %5786 = vdwg.mxu0
  %v5787 = vadd.f32 %v5561, %v5658
  %v5788 = vadd.f32 %v5562, %v5660
  %v5789 = vadd.f32 %v5563, %v5699
  %v5790 = vadd.f32 %v5564, %v5701
  %v5791 = vadd.f32 %v5565, %v5740
  %v5792 = vadd.f32 %v5566, %v5742
  %v5793 = vadd.f32 %v5567, %v5781
  %v5794 = vadd.f32 %v5568, %v5783
  %5795 = vrot.lane.b32.xlu0 %v3300, 18
  %v5796 = vpop.permute.xlu0 %5795
  %5797 = vrot.lane.b32.xlu0 %v3301, 18
  %v5798 = vpop.permute.xlu0 %5797
  %5799 = vrot.lane.b32.xlu0 %v3302, 18
  %v5800 = vpop.permute.xlu0 %5799
  %5801 = vrot.lane.b32.xlu0 %v3303, 18
  %v5802 = vpop.permute.xlu0 %5801
  %5803 = vrot.lane.b32.xlu0 %v3304, 18
  %v5804 = vpop.permute.xlu0 %5803
  %5805 = vrot.lane.b32.xlu0 %v3305, 18
  %v5806 = vpop.permute.xlu0 %5805
  %5807 = vrot.lane.b32.xlu0 %v3306, 18
  %v5808 = vpop.permute.xlu0 %5807
  %5809 = vrot.lane.b32.xlu0 %v3307, 18
  %v5810 = vpop.permute.xlu0 %5809
  %5811 = vrot.lane.b32.xlu0 %v3308, 18
  %v5812 = vpop.permute.xlu0 %5811
  %vm5813 = vcmask 146432
  %v5814 = vsel %vm5813, %v5796, %v5798
  %v5815 = vsel %vm5813, %v5798, %v5800
  %v5816 = vsel %vm5813, %v5800, %v5802
  %v5817 = vsel %vm5813, %v5802, %v5804
  %v5818 = vsel %vm5813, %v5804, %v5806
  %v5819 = vsel %vm5813, %v5806, %v5808
  %v5820 = vsel %vm5813, %v5808, %v5810
  %v5821 = vsel %vm5813, %v5810, %v5812
  %v5823 = vsel %vm161, %v104, 0
  %v5826 = vsel %vm165, %v5814, 0
  %v5829 = vsel %vm165, %v5815, 0
  %v5832 = vsel %vm165, %v5816, 0
  %v5835 = vsel %vm165, %v5817, 0
  %v5838 = vsel %vm165, %v5818, 0
  %v5841 = vsel %vm165, %v5819, 0
  %v5844 = vsel %vm165, %v5820, 0
  %v5847 = vsel %vm165, %v5821, 0
  %5849 = vmatprep.subr.bf16.mxu0 %v5829
  %5850 = vmatpush1.bf16.msra.mxu0 %v5826
  %5851 = vmatprep.subr.bf16.mxu0 0
  %5852 = vmatpush1.bf16.msra.mxu0 0
  %5853 = vmatprep.subr.bf16.mxu0 0
  %5854 = vmatpush1.bf16.msra.mxu0 0
  %5855 = vmatprep.subr.bf16.mxu0 0
  %5856 = vmatpush1.bf16.msra.mxu0 0
  %5857 = vmatprep.subr.bf16.mxu0 0
  %5858 = vmatpush1.bf16.msra.mxu0 0
  %5859 = vmatprep.subr.bf16.mxu0 0
  %5860 = vmatpush1.bf16.msra.mxu0 0
  %5861 = vmatprep.subr.bf16.mxu0 0
  %5862 = vmatpush1.bf16.msra.mxu0 0
  %5863 = vmatprep.subr.bf16.mxu0 0
  %5864 = vmatpush1.bf16.msra.mxu0 0
  %5865 = vmatprep.subr.bf16.mxu0 0
  %5866 = vmatpush1.bf16.msra.mxu0 0
  %5867 = vmatprep.subr.bf16.mxu0 0
  %5868 = vmatpush1.bf16.msra.mxu0 0
  %5869 = vmatprep.subr.bf16.mxu0 0
  %5870 = vmatpush1.bf16.msra.mxu0 0
  %5871 = vmatprep.subr.bf16.mxu0 0
  %5872 = vmatpush1.bf16.msra.mxu0 0
  %5873 = vmatprep.subr.bf16.mxu0 0
  %5874 = vmatpush1.bf16.msra.mxu0 0
  %5875 = vmatprep.subr.bf16.mxu0 0
  %5876 = vmatpush1.bf16.msra.mxu0 0
  %5877 = vmatprep.subr.bf16.mxu0 0
  %5878 = vmatpush1.bf16.msra.mxu0 0
  %5879 = vmatprep.subr.bf16.mxu0 0
  %5880 = vmatpush1.bf16.msra.mxu0 0
  %5881 = vmatprep.mubr.bf16.mxu0 0
  %5882 = vmatmul.mubr.bf16.gmra.mrb[0].mxu0 %v5823
  %v5883 = vpop.f32.mrb[0].mxu0
  %v5884 = vadd.f32 0.0, %v5883
  %v5885 = vpop.f32.mrb[0].mxu0
  %v5886 = vadd.f32 0.0, %v5885
  %v5887 = vpop.f32.mrb[0].mxu0
  %v5888 = vpop.f32.mrb[0].mxu0
  %5889 = vdwg.mxu0
  %5890 = vmatprep.subr.bf16.mxu0 %v5835
  %5891 = vmatpush1.bf16.msra.mxu0 %v5832
  %5892 = vmatprep.subr.bf16.mxu0 0
  %5893 = vmatpush1.bf16.msra.mxu0 0
  %5894 = vmatprep.subr.bf16.mxu0 0
  %5895 = vmatpush1.bf16.msra.mxu0 0
  %5896 = vmatprep.subr.bf16.mxu0 0
  %5897 = vmatpush1.bf16.msra.mxu0 0
  %5898 = vmatprep.subr.bf16.mxu0 0
  %5899 = vmatpush1.bf16.msra.mxu0 0
  %5900 = vmatprep.subr.bf16.mxu0 0
  %5901 = vmatpush1.bf16.msra.mxu0 0
  %5902 = vmatprep.subr.bf16.mxu0 0
  %5903 = vmatpush1.bf16.msra.mxu0 0
  %5904 = vmatprep.subr.bf16.mxu0 0
  %5905 = vmatpush1.bf16.msra.mxu0 0
  %5906 = vmatprep.subr.bf16.mxu0 0
  %5907 = vmatpush1.bf16.msra.mxu0 0
  %5908 = vmatprep.subr.bf16.mxu0 0
  %5909 = vmatpush1.bf16.msra.mxu0 0
  %5910 = vmatprep.subr.bf16.mxu0 0
  %5911 = vmatpush1.bf16.msra.mxu0 0
  %5912 = vmatprep.subr.bf16.mxu0 0
  %5913 = vmatpush1.bf16.msra.mxu0 0
  %5914 = vmatprep.subr.bf16.mxu0 0
  %5915 = vmatpush1.bf16.msra.mxu0 0
  %5916 = vmatprep.subr.bf16.mxu0 0
  %5917 = vmatpush1.bf16.msra.mxu0 0
  %5918 = vmatprep.subr.bf16.mxu0 0
  %5919 = vmatpush1.bf16.msra.mxu0 0
  %5920 = vmatprep.subr.bf16.mxu0 0
  %5921 = vmatpush1.bf16.msra.mxu0 0
  %5922 = vmatprep.mubr.bf16.mxu0 0
  %5923 = vmatmul.mubr.bf16.gmra.mrb[0].mxu0 %v5823
  %v5924 = vpop.f32.mrb[0].mxu0
  %v5925 = vadd.f32 0.0, %v5924
  %v5926 = vpop.f32.mrb[0].mxu0
  %v5927 = vadd.f32 0.0, %v5926
  %v5928 = vpop.f32.mrb[0].mxu0
  %v5929 = vpop.f32.mrb[0].mxu0
  %5930 = vdwg.mxu0
  %5931 = vmatprep.subr.bf16.mxu0 %v5841
  %5932 = vmatpush1.bf16.msra.mxu0 %v5838
  %5933 = vmatprep.subr.bf16.mxu0 0
  %5934 = vmatpush1.bf16.msra.mxu0 0
  %5935 = vmatprep.subr.bf16.mxu0 0
  %5936 = vmatpush1.bf16.msra.mxu0 0
  %5937 = vmatprep.subr.bf16.mxu0 0
  %5938 = vmatpush1.bf16.msra.mxu0 0
  %5939 = vmatprep.subr.bf16.mxu0 0
  %5940 = vmatpush1.bf16.msra.mxu0 0
  %5941 = vmatprep.subr.bf16.mxu0 0
  %5942 = vmatpush1.bf16.msra.mxu0 0
  %5943 = vmatprep.subr.bf16.mxu0 0
  %5944 = vmatpush1.bf16.msra.mxu0 0
  %5945 = vmatprep.subr.bf16.mxu0 0
  %5946 = vmatpush1.bf16.msra.mxu0 0
  %5947 = vmatprep.subr.bf16.mxu0 0
  %5948 = vmatpush1.bf16.msra.mxu0 0
  %5949 = vmatprep.subr.bf16.mxu0 0
  %5950 = vmatpush1.bf16.msra.mxu0 0
  %5951 = vmatprep.subr.bf16.mxu0 0
  %5952 = vmatpush1.bf16.msra.mxu0 0
  %5953 = vmatprep.subr.bf16.mxu0 0
  %5954 = vmatpush1.bf16.msra.mxu0 0
  %5955 = vmatprep.subr.bf16.mxu0 0
  %5956 = vmatpush1.bf16.msra.mxu0 0
  %5957 = vmatprep.subr.bf16.mxu0 0
  %5958 = vmatpush1.bf16.msra.mxu0 0
  %5959 = vmatprep.subr.bf16.mxu0 0
  %5960 = vmatpush1.bf16.msra.mxu0 0
  %5961 = vmatprep.subr.bf16.mxu0 0
  %5962 = vmatpush1.bf16.msra.mxu0 0
  %5963 = vmatprep.mubr.bf16.mxu0 0
  %5964 = vmatmul.mubr.bf16.gmra.mrb[0].mxu0 %v5823
  %v5965 = vpop.f32.mrb[0].mxu0
  %v5966 = vadd.f32 0.0, %v5965
  %v5967 = vpop.f32.mrb[0].mxu0
  %v5968 = vadd.f32 0.0, %v5967
  %v5969 = vpop.f32.mrb[0].mxu0
  %v5970 = vpop.f32.mrb[0].mxu0
  %5971 = vdwg.mxu0
  %5972 = vmatprep.subr.bf16.mxu0 %v5847
  %5973 = vmatpush1.bf16.msra.mxu0 %v5844
  %5974 = vmatprep.subr.bf16.mxu0 0
  %5975 = vmatpush1.bf16.msra.mxu0 0
  %5976 = vmatprep.subr.bf16.mxu0 0
  %5977 = vmatpush1.bf16.msra.mxu0 0
  %5978 = vmatprep.subr.bf16.mxu0 0
  %5979 = vmatpush1.bf16.msra.mxu0 0
  %5980 = vmatprep.subr.bf16.mxu0 0
  %5981 = vmatpush1.bf16.msra.mxu0 0
  %5982 = vmatprep.subr.bf16.mxu0 0
  %5983 = vmatpush1.bf16.msra.mxu0 0
  %5984 = vmatprep.subr.bf16.mxu0 0
  %5985 = vmatpush1.bf16.msra.mxu0 0
  %5986 = vmatprep.subr.bf16.mxu0 0
  %5987 = vmatpush1.bf16.msra.mxu0 0
  %5988 = vmatprep.subr.bf16.mxu0 0
  %5989 = vmatpush1.bf16.msra.mxu0 0
  %5990 = vmatprep.subr.bf16.mxu0 0
  %5991 = vmatpush1.bf16.msra.mxu0 0
  %5992 = vmatprep.subr.bf16.mxu0 0
  %5993 = vmatpush1.bf16.msra.mxu0 0
  %5994 = vmatprep.subr.bf16.mxu0 0
  %5995 = vmatpush1.bf16.msra.mxu0 0
  %5996 = vmatprep.subr.bf16.mxu0 0
  %5997 = vmatpush1.bf16.msra.mxu0 0
  %5998 = vmatprep.subr.bf16.mxu0 0
  %5999 = vmatpush1.bf16.msra.mxu0 0
  %6000 = vmatprep.subr.bf16.mxu0 0
  %6001 = vmatpush1.bf16.msra.mxu0 0
  %6002 = vmatprep.subr.bf16.mxu0 0
  %6003 = vmatpush1.bf16.msra.mxu0 0
  %6004 = vmatprep.mubr.bf16.mxu0 0
  %6005 = vmatmul.mubr.bf16.gmra.mrb[0].mxu0 %v5823
  %v6006 = vpop.f32.mrb[0].mxu0
  %v6007 = vadd.f32 0.0, %v6006
  %v6008 = vpop.f32.mrb[0].mxu0
  %v6009 = vadd.f32 0.0, %v6008
  %v6010 = vpop.f32.mrb[0].mxu0
  %v6011 = vpop.f32.mrb[0].mxu0
  %6012 = vdwg.mxu0
  %v6013 = vadd.f32 %v5787, %v5884
  %v6014 = vadd.f32 %v5788, %v5886
  %v6015 = vadd.f32 %v5789, %v5925
  %v6016 = vadd.f32 %v5790, %v5927
  %v6017 = vadd.f32 %v5791, %v5966
  %v6018 = vadd.f32 %v5792, %v5968
  %v6019 = vadd.f32 %v5793, %v6007
  %v6020 = vadd.f32 %v5794, %v6009
  %6021 = vrot.lane.b32.xlu0 %v3300, 17
  %v6022 = vpop.permute.xlu0 %6021
  %6023 = vrot.lane.b32.xlu0 %v3301, 17
  %v6024 = vpop.permute.xlu0 %6023
  %6025 = vrot.lane.b32.xlu0 %v3302, 17
  %v6026 = vpop.permute.xlu0 %6025
  %6027 = vrot.lane.b32.xlu0 %v3303, 17
  %v6028 = vpop.permute.xlu0 %6027
  %6029 = vrot.lane.b32.xlu0 %v3304, 17
  %v6030 = vpop.permute.xlu0 %6029
  %6031 = vrot.lane.b32.xlu0 %v3305, 17
  %v6032 = vpop.permute.xlu0 %6031
  %6033 = vrot.lane.b32.xlu0 %v3306, 17
  %v6034 = vpop.permute.xlu0 %6033
  %6035 = vrot.lane.b32.xlu0 %v3307, 17
  %v6036 = vpop.permute.xlu0 %6035
  %6037 = vrot.lane.b32.xlu0 %v3308, 17
  %v6038 = vpop.permute.xlu0 %6037
  %vm6039 = vcmask 138240
  %v6040 = vsel %vm6039, %v6022, %v6024
  %v6041 = vsel %vm6039, %v6024, %v6026
  %v6042 = vsel %vm6039, %v6026, %v6028
  %v6043 = vsel %vm6039, %v6028, %v6030
  %v6044 = vsel %vm6039, %v6030, %v6032
  %v6045 = vsel %vm6039, %v6032, %v6034
  %v6046 = vsel %vm6039, %v6034, %v6036
  %v6047 = vsel %vm6039, %v6036, %v6038
  %v6049 = vsel %vm161, %v105, 0
  %v6052 = vsel %vm165, %v6040, 0
  %v6055 = vsel %vm165, %v6041, 0
  %v6058 = vsel %vm165, %v6042, 0
  %v6061 = vsel %vm165, %v6043, 0
  %v6064 = vsel %vm165, %v6044, 0
  %v6067 = vsel %vm165, %v6045, 0
  %v6070 = vsel %vm165, %v6046, 0
  %v6073 = vsel %vm165, %v6047, 0
  %6075 = vmatprep.subr.bf16.mxu0 %v6055
  %6076 = vmatpush1.bf16.msra.mxu0 %v6052
  %6077 = vmatprep.subr.bf16.mxu0 0
  %6078 = vmatpush1.bf16.msra.mxu0 0
  %6079 = vmatprep.subr.bf16.mxu0 0
  %6080 = vmatpush1.bf16.msra.mxu0 0
  %6081 = vmatprep.subr.bf16.mxu0 0
  %6082 = vmatpush1.bf16.msra.mxu0 0
  %6083 = vmatprep.subr.bf16.mxu0 0
  %6084 = vmatpush1.bf16.msra.mxu0 0
  %6085 = vmatprep.subr.bf16.mxu0 0
  %6086 = vmatpush1.bf16.msra.mxu0 0
  %6087 = vmatprep.subr.bf16.mxu0 0
  %6088 = vmatpush1.bf16.msra.mxu0 0
  %6089 = vmatprep.subr.bf16.mxu0 0
  %6090 = vmatpush1.bf16.msra.mxu0 0
  %6091 = vmatprep.subr.bf16.mxu0 0
  %6092 = vmatpush1.bf16.msra.mxu0 0
  %6093 = vmatprep.subr.bf16.mxu0 0
  %6094 = vmatpush1.bf16.msra.mxu0 0
  %6095 = vmatprep.subr.bf16.mxu0 0
  %6096 = vmatpush1.bf16.msra.mxu0 0
  %6097 = vmatprep.subr.bf16.mxu0 0
  %6098 = vmatpush1.bf16.msra.mxu0 0
  %6099 = vmatprep.subr.bf16.mxu0 0
  %6100 = vmatpush1.bf16.msra.mxu0 0
  %6101 = vmatprep.subr.bf16.mxu0 0
  %6102 = vmatpush1.bf16.msra.mxu0 0
  %6103 = vmatprep.subr.bf16.mxu0 0
  %6104 = vmatpush1.bf16.msra.mxu0 0
  %6105 = vmatprep.subr.bf16.mxu0 0
  %6106 = vmatpush1.bf16.msra.mxu0 0
  %6107 = vmatprep.mubr.bf16.mxu0 0
  %6108 = vmatmul.mubr.bf16.gmra.mrb[0].mxu0 %v6049
  %v6109 = vpop.f32.mrb[0].mxu0
  %v6110 = vadd.f32 0.0, %v6109
  %v6111 = vpop.f32.mrb[0].mxu0
  %v6112 = vadd.f32 0.0, %v6111
  %v6113 = vpop.f32.mrb[0].mxu0
  %v6114 = vpop.f32.mrb[0].mxu0
  %6115 = vdwg.mxu0
  %6116 = vmatprep.subr.bf16.mxu0 %v6061
  %6117 = vmatpush1.bf16.msra.mxu0 %v6058
  %6118 = vmatprep.subr.bf16.mxu0 0
  %6119 = vmatpush1.bf16.msra.mxu0 0
  %6120 = vmatprep.subr.bf16.mxu0 0
  %6121 = vmatpush1.bf16.msra.mxu0 0
  %6122 = vmatprep.subr.bf16.mxu0 0
  %6123 = vmatpush1.bf16.msra.mxu0 0
  %6124 = vmatprep.subr.bf16.mxu0 0
  %6125 = vmatpush1.bf16.msra.mxu0 0
  %6126 = vmatprep.subr.bf16.mxu0 0
  %6127 = vmatpush1.bf16.msra.mxu0 0
  %6128 = vmatprep.subr.bf16.mxu0 0
  %6129 = vmatpush1.bf16.msra.mxu0 0
  %6130 = vmatprep.subr.bf16.mxu0 0
  %6131 = vmatpush1.bf16.msra.mxu0 0
  %6132 = vmatprep.subr.bf16.mxu0 0
  %6133 = vmatpush1.bf16.msra.mxu0 0
  %6134 = vmatprep.subr.bf16.mxu0 0
  %6135 = vmatpush1.bf16.msra.mxu0 0
  %6136 = vmatprep.subr.bf16.mxu0 0
  %6137 = vmatpush1.bf16.msra.mxu0 0
  %6138 = vmatprep.subr.bf16.mxu0 0
  %6139 = vmatpush1.bf16.msra.mxu0 0
  %6140 = vmatprep.subr.bf16.mxu0 0
  %6141 = vmatpush1.bf16.msra.mxu0 0
  %6142 = vmatprep.subr.bf16.mxu0 0
  %6143 = vmatpush1.bf16.msra.mxu0 0
  %6144 = vmatprep.subr.bf16.mxu0 0
  %6145 = vmatpush1.bf16.msra.mxu0 0
  %6146 = vmatprep.subr.bf16.mxu0 0
  %6147 = vmatpush1.bf16.msra.mxu0 0
  %6148 = vmatprep.mubr.bf16.mxu0 0
  %6149 = vmatmul.mubr.bf16.gmra.mrb[0].mxu0 %v6049
  %v6150 = vpop.f32.mrb[0].mxu0
  %v6151 = vadd.f32 0.0, %v6150
  %v6152 = vpop.f32.mrb[0].mxu0
  %v6153 = vadd.f32 0.0, %v6152
  %v6154 = vpop.f32.mrb[0].mxu0
  %v6155 = vpop.f32.mrb[0].mxu0
  %6156 = vdwg.mxu0
  %6157 = vmatprep.subr.bf16.mxu0 %v6067
  %6158 = vmatpush1.bf16.msra.mxu0 %v6064
  %6159 = vmatprep.subr.bf16.mxu0 0
  %6160 = vmatpush1.bf16.msra.mxu0 0
  %6161 = vmatprep.subr.bf16.mxu0 0
  %6162 = vmatpush1.bf16.msra.mxu0 0
  %6163 = vmatprep.subr.bf16.mxu0 0
  %6164 = vmatpush1.bf16.msra.mxu0 0
  %6165 = vmatprep.subr.bf16.mxu0 0
  %6166 = vmatpush1.bf16.msra.mxu0 0
  %6167 = vmatprep.subr.bf16.mxu0 0
  %6168 = vmatpush1.bf16.msra.mxu0 0
  %6169 = vmatprep.subr.bf16.mxu0 0
  %6170 = vmatpush1.bf16.msra.mxu0 0
  %6171 = vmatprep.subr.bf16.mxu0 0
  %6172 = vmatpush1.bf16.msra.mxu0 0
  %6173 = vmatprep.subr.bf16.mxu0 0
  %6174 = vmatpush1.bf16.msra.mxu0 0
  %6175 = vmatprep.subr.bf16.mxu0 0
  %6176 = vmatpush1.bf16.msra.mxu0 0
  %6177 = vmatprep.subr.bf16.mxu0 0
  %6178 = vmatpush1.bf16.msra.mxu0 0
  %6179 = vmatprep.subr.bf16.mxu0 0
  %6180 = vmatpush1.bf16.msra.mxu0 0
  %6181 = vmatprep.subr.bf16.mxu0 0
  %6182 = vmatpush1.bf16.msra.mxu0 0
  %6183 = vmatprep.subr.bf16.mxu0 0
  %6184 = vmatpush1.bf16.msra.mxu0 0
  %6185 = vmatprep.subr.bf16.mxu0 0
  %6186 = vmatpush1.bf16.msra.mxu0 0
  %6187 = vmatprep.subr.bf16.mxu0 0
  %6188 = vmatpush1.bf16.msra.mxu0 0
  %6189 = vmatprep.mubr.bf16.mxu0 0
  %6190 = vmatmul.mubr.bf16.gmra.mrb[0].mxu0 %v6049
  %v6191 = vpop.f32.mrb[0].mxu0
  %v6192 = vadd.f32 0.0, %v6191
  %v6193 = vpop.f32.mrb[0].mxu0
  %v6194 = vadd.f32 0.0, %v6193
  %v6195 = vpop.f32.mrb[0].mxu0
  %v6196 = vpop.f32.mrb[0].mxu0
  %6197 = vdwg.mxu0
  %6198 = vmatprep.subr.bf16.mxu0 %v6073
  %6199 = vmatpush1.bf16.msra.mxu0 %v6070
  %6200 = vmatprep.subr.bf16.mxu0 0
  %6201 = vmatpush1.bf16.msra.mxu0 0
  %6202 = vmatprep.subr.bf16.mxu0 0
  %6203 = vmatpush1.bf16.msra.mxu0 0
  %6204 = vmatprep.subr.bf16.mxu0 0
  %6205 = vmatpush1.bf16.msra.mxu0 0
  %6206 = vmatprep.subr.bf16.mxu0 0
  %6207 = vmatpush1.bf16.msra.mxu0 0
  %6208 = vmatprep.subr.bf16.mxu0 0
  %6209 = vmatpush1.bf16.msra.mxu0 0
  %6210 = vmatprep.subr.bf16.mxu0 0
  %6211 = vmatpush1.bf16.msra.mxu0 0
  %6212 = vmatprep.subr.bf16.mxu0 0
  %6213 = vmatpush1.bf16.msra.mxu0 0
  %6214 = vmatprep.subr.bf16.mxu0 0
  %6215 = vmatpush1.bf16.msra.mxu0 0
  %6216 = vmatprep.subr.bf16.mxu0 0
  %6217 = vmatpush1.bf16.msra.mxu0 0
  %6218 = vmatprep.subr.bf16.mxu0 0
  %6219 = vmatpush1.bf16.msra.mxu0 0
  %6220 = vmatprep.subr.bf16.mxu0 0
  %6221 = vmatpush1.bf16.msra.mxu0 0
  %6222 = vmatprep.subr.bf16.mxu0 0
  %6223 = vmatpush1.bf16.msra.mxu0 0
  %6224 = vmatprep.subr.bf16.mxu0 0
  %6225 = vmatpush1.bf16.msra.mxu0 0
  %6226 = vmatprep.subr.bf16.mxu0 0
  %6227 = vmatpush1.bf16.msra.mxu0 0
  %6228 = vmatprep.subr.bf16.mxu0 0
  %6229 = vmatpush1.bf16.msra.mxu0 0
  %6230 = vmatprep.mubr.bf16.mxu0 0
  %6231 = vmatmul.mubr.bf16.gmra.mrb[0].mxu0 %v6049
  %v6232 = vpop.f32.mrb[0].mxu0
  %v6233 = vadd.f32 0.0, %v6232
  %v6234 = vpop.f32.mrb[0].mxu0
  %v6235 = vadd.f32 0.0, %v6234
  %v6236 = vpop.f32.mrb[0].mxu0
  %v6237 = vpop.f32.mrb[0].mxu0
  %6238 = vdwg.mxu0
  %v6239 = vadd.f32 %v6013, %v6110
  %v6240 = vadd.f32 %v6014, %v6112
  %v6241 = vadd.f32 %v6015, %v6151
  %v6242 = vadd.f32 %v6016, %v6153
  %v6243 = vadd.f32 %v6017, %v6192
  %v6244 = vadd.f32 %v6018, %v6194
  %v6245 = vadd.f32 %v6019, %v6233
  %v6246 = vadd.f32 %v6020, %v6235
  %v6247 = vld [vmem:[%s3] sm:$0xff]
  %6249 = vset.pattern.permute.xlu0 0
  %6250 = vperm.xlu0 %6249, %v6247
  %v6251 = vpop.permute.xlu0 %6250
  %v6253 = vadd.f32 %v6239, %v6251
  %v6254 = vadd.f32 %v6240, %v6251
  %v6255 = vadd.f32 %v6241, %v6251
  %v6256 = vadd.f32 %v6242, %v6251
  %v6257 = vadd.f32 %v6243, %v6251
  %v6258 = vadd.f32 %v6244, %v6251
  %v6259 = vadd.f32 %v6245, %v6251
  %v6260 = vadd.f32 %v6246, %v6251
  %v6261 = vmax.f32 %v6253, 0.0
  %v6262 = vmax.f32 %v6254, 0.0
  %v6263 = vmax.f32 %v6255, 0.0
  %v6264 = vmax.f32 %v6256, 0.0
  %v6265 = vmax.f32 %v6257, 0.0
  %v6266 = vmax.f32 %v6258, 0.0
  %v6267 = vmax.f32 %v6259, 0.0
  %v6268 = vmax.f32 %v6260, 0.0
  %v6270 = vlaneseq
  %v6271 = vshrl.u32 %v6270, 7
  %v6272 = vsub.s32 0, %v6271
  %v6273 = vrot.slane %v78, %v6272
  %v6274 = vlaneseq
  %v6275 = vshrl.u32 %v6274, 7
  %v6276 = vsub.s32 1, %v6275
  %v6277 = vrot.slane %v78, %v6276
  %v6278 = vlaneseq
  %v6279 = vshrl.u32 %v6278, 7
  %v6280 = vsub.s32 2, %v6279
  %v6281 = vrot.slane %v78, %v6280
  %v6282 = vlaneseq
  %v6283 = vshrl.u32 %v6282, 7
  %v6284 = vsub.s32 3, %v6283
  %v6285 = vrot.slane %v78, %v6284
  %v6286 = vlaneseq
  %v6287 = vshrl.u32 %v6286, 7
  %v6288 = vsub.s32 4, %v6287
  %v6289 = vrot.slane %v78, %v6288
  %v6290 = vlaneseq
  %v6291 = vshrl.u32 %v6290, 7
  %v6292 = vsub.s32 5, %v6291
  %v6293 = vrot.slane %v78, %v6292
  %v6294 = vlaneseq
  %v6295 = vshrl.u32 %v6294, 7
  %v6296 = vsub.s32 6, %v6295
  %v6297 = vrot.slane %v78, %v6296
  %v6298 = vlaneseq
  %v6299 = vshrl.u32 %v6298, 7
  %v6300 = vsub.s32 7, %v6299
  %v6301 = vrot.slane %v78, %v6300
  %v6310 = vmul.f32 %v6261, %v6273
  %v6311 = vmul.f32 %v6262, %v6277
  %v6312 = vmul.f32 %v6263, %v6281
  %v6313 = vmul.f32 %v6264, %v6285
  %v6314 = vmul.f32 %v6265, %v6289
  %v6315 = vmul.f32 %v6266, %v6293
  %v6316 = vmul.f32 %v6267, %v6297
  %v6317 = vmul.f32 %v6268, %v6301
  %v6318 = vpack.c.bf16 %v6310, %v6310
  %v6319 = vpack.c.bf16 %v6311, %v6311
  %v6320 = vpack.c.bf16 %v6312, %v6312
  %v6321 = vpack.c.bf16 %v6313, %v6313
  %v6322 = vpack.c.bf16 %v6314, %v6314
  %v6323 = vpack.c.bf16 %v6315, %v6315
  %v6324 = vpack.c.bf16 %v6316, %v6316
  %v6325 = vpack.c.bf16 %v6317, %v6317
  %v6334 = vunpack.c.l.b16 %v6318
  %v6335 = vunpack.c.l.b16 %v6319
  %v6336 = vunpack.c.l.b16 %v6320
  %v6337 = vunpack.c.l.b16 %v6321
  %v6338 = vunpack.c.l.b16 %v6322
  %v6339 = vunpack.c.l.b16 %v6323
  %v6340 = vunpack.c.l.b16 %v6324
  %v6341 = vunpack.c.l.b16 %v6325
  %v6342 = vpack.c.b16 %v6335, %v6334
  %v6343 = vpack.c.b16 %v6337, %v6336
  %v6344 = vpack.c.b16 %v6339, %v6338
  %v6345 = vpack.c.b16 %v6341, %v6340
  %6350 = vst [vmem:[#allocation3 + $0x4] sm:$0xff] %v6342
  %6351 = vst [vmem:[#allocation3 + $0xc] sm:$0xff] %v6343
  %6352 = vst [vmem:[#allocation3 + $0x14] sm:$0xff] %v6344
  %6353 = vst [vmem:[#allocation3 + $0x1c] sm:$0xff] %v6345
  %v6354 = vld [vmem:[%s4] sm:$0xf]
  %v6355 = vld [vmem:[%s4 + $0x4] sm:$0xf]
  %v6356 = vld [vmem:[%s4 + $0x8] sm:$0xf]
  %v6357 = vld [vmem:[%s4 + $0xc] sm:$0xf]
  %v6358 = vld [vmem:[%s4 + $0x10] sm:$0xf]
  %v6359 = vld [vmem:[%s4 + $0x14] sm:$0xf]
  %v6360 = vld [vmem:[%s4 + $0x18] sm:$0xf]
  %v6361 = vld [vmem:[%s4 + $0x1c] sm:$0xf]
  %v6362 = vld [vmem:[%s4 + $0x20] sm:$0xf]
  %v6363 = vld [vmem:[%s4 + $0x24] sm:$0xf]
  %v6364 = vld [vmem:[%s4 + $0x28] sm:$0xf]
  %v6365 = vld [vmem:[%s4 + $0x2c] sm:$0xf]
  %v6366 = vld [vmem:[%s4 + $0x30] sm:$0xf]
  %v6367 = vld [vmem:[%s4 + $0x34] sm:$0xf]
  %v6368 = vld [vmem:[%s4 + $0x38] sm:$0xf]
  %v6369 = vld [vmem:[%s4 + $0x3c] sm:$0xf]
  %v6370 = vld [vmem:[%s4 + $0x40] sm:$0xf]
  %v6371 = vld [vmem:[%s4 + $0x44] sm:$0xf]
  %v6372 = vld [vmem:[%s4 + $0x48] sm:$0xf]
  %v6373 = vld [vmem:[%s4 + $0x4c] sm:$0xf]
  %v6374 = vld [vmem:[%s4 + $0x50] sm:$0xf]
  %v6375 = vld [vmem:[%s4 + $0x54] sm:$0xf]
  %v6376 = vld [vmem:[%s4 + $0x58] sm:$0xf]
  %v6377 = vld [vmem:[%s4 + $0x5c] sm:$0xf]
  %v6378 = vld [vmem:[%s4 + $0x60] sm:$0xf]
  %v6379 = vld [vmem:[%s4 + $0x64] sm:$0xf]
  %v6380 = vld [vmem:[%s4 + $0x68] sm:$0xf]
  %v6381 = vld [vmem:[#allocation3] sm:$0xff]
  %v6382 = vld [vmem:[#allocation3 + $0x8] sm:$0xff]
  %v6383 = vld [vmem:[#allocation3 + $0x10] sm:$0xff]
  %v6384 = vld [vmem:[#allocation3 + $0x18] sm:$0xff]
  %v6385 = vld [vmem:[#allocation3 + $0x20] sm:$0xf]
  %v6391 = vunpack.c.l.b16 %v6381
  %v6392 = vunpack.c.h.b16 %v6381
  %v6393 = vunpack.c.l.b16 %v6382
  %v6394 = vunpack.c.h.b16 %v6382
  %v6395 = vunpack.c.l.b16 %v6383
  %v6396 = vunpack.c.h.b16 %v6383
  %v6397 = vunpack.c.l.b16 %v6384
  %v6398 = vunpack.c.h.b16 %v6384
  %v6399 = vunpack.c.l.b16 %v6385
  %v6400 = vpack.c.b16 %v6391, %v6391
  %v6401 = vpack.c.b16 %v6392, %v6392
  %v6402 = vpack.c.b16 %v6393, %v6393
  %v6403 = vpack.c.b16 %v6394, %v6394
  %v6404 = vpack.c.b16 %v6395, %v6395
  %v6405 = vpack.c.b16 %v6396, %v6396
  %v6406 = vpack.c.b16 %v6397, %v6397
  %v6407 = vpack.c.b16 %v6398, %v6398
  %v6408 = vpack.c.b16 %v6399, %v6399
  %6409 = vrot.lane.b32.xlu0 %v6400, 110
  %v6410 = vpop.permute.xlu0 %6409
  %6411 = vrot.lane.b32.xlu0 %v6401, 110
  %v6412 = vpop.permute.xlu0 %6411
  %6413 = vrot.lane.b32.xlu0 %v6402, 110
  %v6414 = vpop.permute.xlu0 %6413
  %6415 = vrot.lane.b32.xlu0 %v6403, 110
  %v6416 = vpop.permute.xlu0 %6415
  %6417 = vrot.lane.b32.xlu0 %v6404, 110
  %v6418 = vpop.permute.xlu0 %6417
  %6419 = vrot.lane.b32.xlu0 %v6405, 110
  %v6420 = vpop.permute.xlu0 %6419
  %6421 = vrot.lane.b32.xlu0 %v6406, 110
  %v6422 = vpop.permute.xlu0 %6421
  %6423 = vrot.lane.b32.xlu0 %v6407, 110
  %v6424 = vpop.permute.xlu0 %6423
  %6425 = vrot.lane.b32.xlu0 %v6408, 110
  %v6426 = vpop.permute.xlu0 %6425
  %v6427 = vsel %vm152, %v6410, %v6412
  %v6428 = vsel %vm152, %v6412, %v6414
  %v6429 = vsel %vm152, %v6414, %v6416
  %v6430 = vsel %vm152, %v6416, %v6418
  %v6431 = vsel %vm152, %v6418, %v6420
  %v6432 = vsel %vm152, %v6420, %v6422
  %v6433 = vsel %vm152, %v6422, %v6424
  %v6434 = vsel %vm152, %v6424, %v6426
  %v6436 = vsel %vm161, %v6355, 0
  %v6439 = vsel %vm165, %v6427, 0
  %v6442 = vsel %vm165, %v6428, 0
  %v6445 = vsel %vm165, %v6429, 0
  %v6448 = vsel %vm165, %v6430, 0
  %v6451 = vsel %vm165, %v6431, 0
  %v6454 = vsel %vm165, %v6432, 0
  %v6457 = vsel %vm165, %v6433, 0
  %v6460 = vsel %vm165, %v6434, 0
  %6462 = vmatprep.subr.bf16.mxu0 %v6442
  %6463 = vmatpush1.bf16.msra.mxu0 %v6439
  %6464 = vmatprep.subr.bf16.mxu0 0
  %6465 = vmatpush1.bf16.msra.mxu0 0
  %6466 = vmatprep.subr.bf16.mxu0 0
  %6467 = vmatpush1.bf16.msra.mxu0 0
  %6468 = vmatprep.subr.bf16.mxu0 0
  %6469 = vmatpush1.bf16.msra.mxu0 0
  %6470 = vmatprep.subr.bf16.mxu0 0
  %6471 = vmatpush1.bf16.msra.mxu0 0
  %6472 = vmatprep.subr.bf16.mxu0 0
  %6473 = vmatpush1.bf16.msra.mxu0 0
  %6474 = vmatprep.subr.bf16.mxu0 0
  %6475 = vmatpush1.bf16.msra.mxu0 0
  %6476 = vmatprep.subr.bf16.mxu0 0
  %6477 = vmatpush1.bf16.msra.mxu0 0
  %6478 = vmatprep.subr.bf16.mxu0 0
  %6479 = vmatpush1.bf16.msra.mxu0 0
  %6480 = vmatprep.subr.bf16.mxu0 0
  %6481 = vmatpush1.bf16.msra.mxu0 0
  %6482 = vmatprep.subr.bf16.mxu0 0
  %6483 = vmatpush1.bf16.msra.mxu0 0
  %6484 = vmatprep.subr.bf16.mxu0 0
  %6485 = vmatpush1.bf16.msra.mxu0 0
  %6486 = vmatprep.subr.bf16.mxu0 0
  %6487 = vmatpush1.bf16.msra.mxu0 0
  %6488 = vmatprep.subr.bf16.mxu0 0
  %6489 = vmatpush1.bf16.msra.mxu0 0
  %6490 = vmatprep.subr.bf16.mxu0 0
  %6491 = vmatpush1.bf16.msra.mxu0 0
  %6492 = vmatprep.subr.bf16.mxu0 0
  %6493 = vmatpush1.bf16.msra.mxu0 0
  %6494 = vmatprep.mubr.bf16.mxu0 0
  %6495 = vmatmul.mubr.bf16.gmra.mrb[0].mxu0 %v6436
  %v6496 = vpop.f32.mrb[0].mxu0
  %v6497 = vadd.f32 0.0, %v6496
  %v6498 = vpop.f32.mrb[0].mxu0
  %v6499 = vadd.f32 0.0, %v6498
  %v6500 = vpop.f32.mrb[0].mxu0
  %v6501 = vpop.f32.mrb[0].mxu0
  %6502 = vdwg.mxu0
  %6503 = vmatprep.subr.bf16.mxu0 %v6448
  %6504 = vmatpush1.bf16.msra.mxu0 %v6445
  %6505 = vmatprep.subr.bf16.mxu0 0
  %6506 = vmatpush1.bf16.msra.mxu0 0
  %6507 = vmatprep.subr.bf16.mxu0 0
  %6508 = vmatpush1.bf16.msra.mxu0 0
  %6509 = vmatprep.subr.bf16.mxu0 0
  %6510 = vmatpush1.bf16.msra.mxu0 0
  %6511 = vmatprep.subr.bf16.mxu0 0
  %6512 = vmatpush1.bf16.msra.mxu0 0
  %6513 = vmatprep.subr.bf16.mxu0 0
  %6514 = vmatpush1.bf16.msra.mxu0 0
  %6515 = vmatprep.subr.bf16.mxu0 0
  %6516 = vmatpush1.bf16.msra.mxu0 0
  %6517 = vmatprep.subr.bf16.mxu0 0
  %6518 = vmatpush1.bf16.msra.mxu0 0
  %6519 = vmatprep.subr.bf16.mxu0 0
  %6520 = vmatpush1.bf16.msra.mxu0 0
  %6521 = vmatprep.subr.bf16.mxu0 0
  %6522 = vmatpush1.bf16.msra.mxu0 0
  %6523 = vmatprep.subr.bf16.mxu0 0
  %6524 = vmatpush1.bf16.msra.mxu0 0
  %6525 = vmatprep.subr.bf16.mxu0 0
  %6526 = vmatpush1.bf16.msra.mxu0 0
  %6527 = vmatprep.subr.bf16.mxu0 0
  %6528 = vmatpush1.bf16.msra.mxu0 0
  %6529 = vmatprep.subr.bf16.mxu0 0
  %6530 = vmatpush1.bf16.msra.mxu0 0
  %6531 = vmatprep.subr.bf16.mxu0 0
  %6532 = vmatpush1.bf16.msra.mxu0 0
  %6533 = vmatprep.subr.bf16.mxu0 0
  %6534 = vmatpush1.bf16.msra.mxu0 0
  %6535 = vmatprep.mubr.bf16.mxu0 0
  %6536 = vmatmul.mubr.bf16.gmra.mrb[0].mxu0 %v6436
  %v6537 = vpop.f32.mrb[0].mxu0
  %v6538 = vadd.f32 0.0, %v6537
  %v6539 = vpop.f32.mrb[0].mxu0
  %v6540 = vadd.f32 0.0, %v6539
  %v6541 = vpop.f32.mrb[0].mxu0
  %v6542 = vpop.f32.mrb[0].mxu0
  %6543 = vdwg.mxu0
  %6544 = vmatprep.subr.bf16.mxu0 %v6454
  %6545 = vmatpush1.bf16.msra.mxu0 %v6451
  %6546 = vmatprep.subr.bf16.mxu0 0
  %6547 = vmatpush1.bf16.msra.mxu0 0
  %6548 = vmatprep.subr.bf16.mxu0 0
  %6549 = vmatpush1.bf16.msra.mxu0 0
  %6550 = vmatprep.subr.bf16.mxu0 0
  %6551 = vmatpush1.bf16.msra.mxu0 0
  %6552 = vmatprep.subr.bf16.mxu0 0
  %6553 = vmatpush1.bf16.msra.mxu0 0
  %6554 = vmatprep.subr.bf16.mxu0 0
  %6555 = vmatpush1.bf16.msra.mxu0 0
  %6556 = vmatprep.subr.bf16.mxu0 0
  %6557 = vmatpush1.bf16.msra.mxu0 0
  %6558 = vmatprep.subr.bf16.mxu0 0
  %6559 = vmatpush1.bf16.msra.mxu0 0
  %6560 = vmatprep.subr.bf16.mxu0 0
  %6561 = vmatpush1.bf16.msra.mxu0 0
  %6562 = vmatprep.subr.bf16.mxu0 0
  %6563 = vmatpush1.bf16.msra.mxu0 0
  %6564 = vmatprep.subr.bf16.mxu0 0
  %6565 = vmatpush1.bf16.msra.mxu0 0
  %6566 = vmatprep.subr.bf16.mxu0 0
  %6567 = vmatpush1.bf16.msra.mxu0 0
  %6568 = vmatprep.subr.bf16.mxu0 0
  %6569 = vmatpush1.bf16.msra.mxu0 0
  %6570 = vmatprep.subr.bf16.mxu0 0
  %6571 = vmatpush1.bf16.msra.mxu0 0
  %6572 = vmatprep.subr.bf16.mxu0 0
  %6573 = vmatpush1.bf16.msra.mxu0 0
  %6574 = vmatprep.subr.bf16.mxu0 0
  %6575 = vmatpush1.bf16.msra.mxu0 0
  %6576 = vmatprep.mubr.bf16.mxu0 0
  %6577 = vmatmul.mubr.bf16.gmra.mrb[0].mxu0 %v6436
  %v6578 = vpop.f32.mrb[0].mxu0
  %v6579 = vadd.f32 0.0, %v6578
  %v6580 = vpop.f32.mrb[0].mxu0
  %v6581 = vadd.f32 0.0, %v6580
  %v6582 = vpop.f32.mrb[0].mxu0
  %v6583 = vpop.f32.mrb[0].mxu0
  %6584 = vdwg.mxu0
  %6585 = vmatprep.subr.bf16.mxu0 %v6460
  %6586 = vmatpush1.bf16.msra.mxu0 %v6457
  %6587 = vmatprep.subr.bf16.mxu0 0
  %6588 = vmatpush1.bf16.msra.mxu0 0
  %6589 = vmatprep.subr.bf16.mxu0 0
  %6590 = vmatpush1.bf16.msra.mxu0 0
  %6591 = vmatprep.subr.bf16.mxu0 0
  %6592 = vmatpush1.bf16.msra.mxu0 0
  %6593 = vmatprep.subr.bf16.mxu0 0
  %6594 = vmatpush1.bf16.msra.mxu0 0
  %6595 = vmatprep.subr.bf16.mxu0 0
  %6596 = vmatpush1.bf16.msra.mxu0 0
  %6597 = vmatprep.subr.bf16.mxu0 0
  %6598 = vmatpush1.bf16.msra.mxu0 0
  %6599 = vmatprep.subr.bf16.mxu0 0
  %6600 = vmatpush1.bf16.msra.mxu0 0
  %6601 = vmatprep.subr.bf16.mxu0 0
  %6602 = vmatpush1.bf16.msra.mxu0 0
  %6603 = vmatprep.subr.bf16.mxu0 0
  %6604 = vmatpush1.bf16.msra.mxu0 0
  %6605 = vmatprep.subr.bf16.mxu0 0
  %6606 = vmatpush1.bf16.msra.mxu0 0
  %6607 = vmatprep.subr.bf16.mxu0 0
  %6608 = vmatpush1.bf16.msra.mxu0 0
  %6609 = vmatprep.subr.bf16.mxu0 0
  %6610 = vmatpush1.bf16.msra.mxu0 0
  %6611 = vmatprep.subr.bf16.mxu0 0
  %6612 = vmatpush1.bf16.msra.mxu0 0
  %6613 = vmatprep.subr.bf16.mxu0 0
  %6614 = vmatpush1.bf16.msra.mxu0 0
  %6615 = vmatprep.subr.bf16.mxu0 0
  %6616 = vmatpush1.bf16.msra.mxu0 0
  %6617 = vmatprep.mubr.bf16.mxu0 0
  %6618 = vmatmul.mubr.bf16.gmra.mrb[0].mxu0 %v6436
  %v6619 = vpop.f32.mrb[0].mxu0
  %v6620 = vadd.f32 0.0, %v6619
  %v6621 = vpop.f32.mrb[0].mxu0
  %v6622 = vadd.f32 0.0, %v6621
  %v6623 = vpop.f32.mrb[0].mxu0
  %v6624 = vpop.f32.mrb[0].mxu0
  %6625 = vdwg.mxu0
  %6626 = vrot.lane.b32.xlu0 %v6400, 111
  %v6627 = vpop.permute.xlu0 %6626
  %6628 = vrot.lane.b32.xlu0 %v6401, 111
  %v6629 = vpop.permute.xlu0 %6628
  %6630 = vrot.lane.b32.xlu0 %v6402, 111
  %v6631 = vpop.permute.xlu0 %6630
  %6632 = vrot.lane.b32.xlu0 %v6403, 111
  %v6633 = vpop.permute.xlu0 %6632
  %6634 = vrot.lane.b32.xlu0 %v6404, 111
  %v6635 = vpop.permute.xlu0 %6634
  %6636 = vrot.lane.b32.xlu0 %v6405, 111
  %v6637 = vpop.permute.xlu0 %6636
  %6638 = vrot.lane.b32.xlu0 %v6406, 111
  %v6639 = vpop.permute.xlu0 %6638
  %6640 = vrot.lane.b32.xlu0 %v6407, 111
  %v6641 = vpop.permute.xlu0 %6640
  %6642 = vrot.lane.b32.xlu0 %v6408, 111
  %v6643 = vpop.permute.xlu0 %6642
  %v6644 = vsel %vm372, %v6627, %v6629
  %v6645 = vsel %vm372, %v6629, %v6631
  %v6646 = vsel %vm372, %v6631, %v6633
  %v6647 = vsel %vm372, %v6633, %v6635
  %v6648 = vsel %vm372, %v6635, %v6637
  %v6649 = vsel %vm372, %v6637, %v6639
  %v6650 = vsel %vm372, %v6639, %v6641
  %v6651 = vsel %vm372, %v6641, %v6643
  %v6653 = vsel %vm161, %v6354, 0
  %v6656 = vsel %vm165, %v6644, 0
  %v6659 = vsel %vm165, %v6645, 0
  %v6662 = vsel %vm165, %v6646, 0
  %v6665 = vsel %vm165, %v6647, 0
  %v6668 = vsel %vm165, %v6648, 0
  %v6671 = vsel %vm165, %v6649, 0
  %v6674 = vsel %vm165, %v6650, 0
  %v6677 = vsel %vm165, %v6651, 0
  %6679 = vmatprep.subr.bf16.mxu0 %v6659
  %6680 = vmatpush1.bf16.msra.mxu0 %v6656
  %6681 = vmatprep.subr.bf16.mxu0 0
  %6682 = vmatpush1.bf16.msra.mxu0 0
  %6683 = vmatprep.subr.bf16.mxu0 0
  %6684 = vmatpush1.bf16.msra.mxu0 0
  %6685 = vmatprep.subr.bf16.mxu0 0
  %6686 = vmatpush1.bf16.msra.mxu0 0
  %6687 = vmatprep.subr.bf16.mxu0 0
  %6688 = vmatpush1.bf16.msra.mxu0 0
  %6689 = vmatprep.subr.bf16.mxu0 0
  %6690 = vmatpush1.bf16.msra.mxu0 0
  %6691 = vmatprep.subr.bf16.mxu0 0
  %6692 = vmatpush1.bf16.msra.mxu0 0
  %6693 = vmatprep.subr.bf16.mxu0 0
  %6694 = vmatpush1.bf16.msra.mxu0 0
  %6695 = vmatprep.subr.bf16.mxu0 0
  %6696 = vmatpush1.bf16.msra.mxu0 0
  %6697 = vmatprep.subr.bf16.mxu0 0
  %6698 = vmatpush1.bf16.msra.mxu0 0
  %6699 = vmatprep.subr.bf16.mxu0 0
  %6700 = vmatpush1.bf16.msra.mxu0 0
  %6701 = vmatprep.subr.bf16.mxu0 0
  %6702 = vmatpush1.bf16.msra.mxu0 0
  %6703 = vmatprep.subr.bf16.mxu0 0
  %6704 = vmatpush1.bf16.msra.mxu0 0
  %6705 = vmatprep.subr.bf16.mxu0 0
  %6706 = vmatpush1.bf16.msra.mxu0 0
  %6707 = vmatprep.subr.bf16.mxu0 0
  %6708 = vmatpush1.bf16.msra.mxu0 0
  %6709 = vmatprep.subr.bf16.mxu0 0
  %6710 = vmatpush1.bf16.msra.mxu0 0
  %6711 = vmatprep.mubr.bf16.mxu0 0
  %6712 = vmatmul.mubr.bf16.gmra.mrb[0].mxu0 %v6653
  %v6713 = vpop.f32.mrb[0].mxu0
  %v6714 = vadd.f32 %v6497, %v6713
  %v6715 = vpop.f32.mrb[0].mxu0
  %v6716 = vadd.f32 %v6499, %v6715
  %v6717 = vpop.f32.mrb[0].mxu0
  %v6718 = vpop.f32.mrb[0].mxu0
  %6719 = vdwg.mxu0
  %6720 = vmatprep.subr.bf16.mxu0 %v6665
  %6721 = vmatpush1.bf16.msra.mxu0 %v6662
  %6722 = vmatprep.subr.bf16.mxu0 0
  %6723 = vmatpush1.bf16.msra.mxu0 0
  %6724 = vmatprep.subr.bf16.mxu0 0
  %6725 = vmatpush1.bf16.msra.mxu0 0
  %6726 = vmatprep.subr.bf16.mxu0 0
  %6727 = vmatpush1.bf16.msra.mxu0 0
  %6728 = vmatprep.subr.bf16.mxu0 0
  %6729 = vmatpush1.bf16.msra.mxu0 0
  %6730 = vmatprep.subr.bf16.mxu0 0
  %6731 = vmatpush1.bf16.msra.mxu0 0
  %6732 = vmatprep.subr.bf16.mxu0 0
  %6733 = vmatpush1.bf16.msra.mxu0 0
  %6734 = vmatprep.subr.bf16.mxu0 0
  %6735 = vmatpush1.bf16.msra.mxu0 0
  %6736 = vmatprep.subr.bf16.mxu0 0
  %6737 = vmatpush1.bf16.msra.mxu0 0
  %6738 = vmatprep.subr.bf16.mxu0 0
  %6739 = vmatpush1.bf16.msra.mxu0 0
  %6740 = vmatprep.subr.bf16.mxu0 0
  %6741 = vmatpush1.bf16.msra.mxu0 0
  %6742 = vmatprep.subr.bf16.mxu0 0
  %6743 = vmatpush1.bf16.msra.mxu0 0
  %6744 = vmatprep.subr.bf16.mxu0 0
  %6745 = vmatpush1.bf16.msra.mxu0 0
  %6746 = vmatprep.subr.bf16.mxu0 0
  %6747 = vmatpush1.bf16.msra.mxu0 0
  %6748 = vmatprep.subr.bf16.mxu0 0
  %6749 = vmatpush1.bf16.msra.mxu0 0
  %6750 = vmatprep.subr.bf16.mxu0 0
  %6751 = vmatpush1.bf16.msra.mxu0 0
  %6752 = vmatprep.mubr.bf16.mxu0 0
  %6753 = vmatmul.mubr.bf16.gmra.mrb[0].mxu0 %v6653
  %v6754 = vpop.f32.mrb[0].mxu0
  %v6755 = vadd.f32 %v6538, %v6754
  %v6756 = vpop.f32.mrb[0].mxu0
  %v6757 = vadd.f32 %v6540, %v6756
  %v6758 = vpop.f32.mrb[0].mxu0
  %v6759 = vpop.f32.mrb[0].mxu0
  %6760 = vdwg.mxu0
  %6761 = vmatprep.subr.bf16.mxu0 %v6671
  %6762 = vmatpush1.bf16.msra.mxu0 %v6668
  %6763 = vmatprep.subr.bf16.mxu0 0
  %6764 = vmatpush1.bf16.msra.mxu0 0
  %6765 = vmatprep.subr.bf16.mxu0 0
  %6766 = vmatpush1.bf16.msra.mxu0 0
  %6767 = vmatprep.subr.bf16.mxu0 0
  %6768 = vmatpush1.bf16.msra.mxu0 0
  %6769 = vmatprep.subr.bf16.mxu0 0
  %6770 = vmatpush1.bf16.msra.mxu0 0
  %6771 = vmatprep.subr.bf16.mxu0 0
  %6772 = vmatpush1.bf16.msra.mxu0 0
  %6773 = vmatprep.subr.bf16.mxu0 0
  %6774 = vmatpush1.bf16.msra.mxu0 0
  %6775 = vmatprep.subr.bf16.mxu0 0
  %6776 = vmatpush1.bf16.msra.mxu0 0
  %6777 = vmatprep.subr.bf16.mxu0 0
  %6778 = vmatpush1.bf16.msra.mxu0 0
  %6779 = vmatprep.subr.bf16.mxu0 0
  %6780 = vmatpush1.bf16.msra.mxu0 0
  %6781 = vmatprep.subr.bf16.mxu0 0
  %6782 = vmatpush1.bf16.msra.mxu0 0
  %6783 = vmatprep.subr.bf16.mxu0 0
  %6784 = vmatpush1.bf16.msra.mxu0 0
  %6785 = vmatprep.subr.bf16.mxu0 0
  %6786 = vmatpush1.bf16.msra.mxu0 0
  %6787 = vmatprep.subr.bf16.mxu0 0
  %6788 = vmatpush1.bf16.msra.mxu0 0
  %6789 = vmatprep.subr.bf16.mxu0 0
  %6790 = vmatpush1.bf16.msra.mxu0 0
  %6791 = vmatprep.subr.bf16.mxu0 0
  %6792 = vmatpush1.bf16.msra.mxu0 0
  %6793 = vmatprep.mubr.bf16.mxu0 0
  %6794 = vmatmul.mubr.bf16.gmra.mrb[0].mxu0 %v6653
  %v6795 = vpop.f32.mrb[0].mxu0
  %v6796 = vadd.f32 %v6579, %v6795
  %v6797 = vpop.f32.mrb[0].mxu0
  %v6798 = vadd.f32 %v6581, %v6797
  %v6799 = vpop.f32.mrb[0].mxu0
  %v6800 = vpop.f32.mrb[0].mxu0
  %6801 = vdwg.mxu0
  %6802 = vmatprep.subr.bf16.mxu0 %v6677
  %6803 = vmatpush1.bf16.msra.mxu0 %v6674
  %6804 = vmatprep.subr.bf16.mxu0 0
  %6805 = vmatpush1.bf16.msra.mxu0 0
  %6806 = vmatprep.subr.bf16.mxu0 0
  %6807 = vmatpush1.bf16.msra.mxu0 0
  %6808 = vmatprep.subr.bf16.mxu0 0
  %6809 = vmatpush1.bf16.msra.mxu0 0
  %6810 = vmatprep.subr.bf16.mxu0 0
  %6811 = vmatpush1.bf16.msra.mxu0 0
  %6812 = vmatprep.subr.bf16.mxu0 0
  %6813 = vmatpush1.bf16.msra.mxu0 0
  %6814 = vmatprep.subr.bf16.mxu0 0
  %6815 = vmatpush1.bf16.msra.mxu0 0
  %6816 = vmatprep.subr.bf16.mxu0 0
  %6817 = vmatpush1.bf16.msra.mxu0 0
  %6818 = vmatprep.subr.bf16.mxu0 0
  %6819 = vmatpush1.bf16.msra.mxu0 0
  %6820 = vmatprep.subr.bf16.mxu0 0
  %6821 = vmatpush1.bf16.msra.mxu0 0
  %6822 = vmatprep.subr.bf16.mxu0 0
  %6823 = vmatpush1.bf16.msra.mxu0 0
  %6824 = vmatprep.subr.bf16.mxu0 0
  %6825 = vmatpush1.bf16.msra.mxu0 0
  %6826 = vmatprep.subr.bf16.mxu0 0
  %6827 = vmatpush1.bf16.msra.mxu0 0
  %6828 = vmatprep.subr.bf16.mxu0 0
  %6829 = vmatpush1.bf16.msra.mxu0 0
  %6830 = vmatprep.subr.bf16.mxu0 0
  %6831 = vmatpush1.bf16.msra.mxu0 0
  %6832 = vmatprep.subr.bf16.mxu0 0
  %6833 = vmatpush1.bf16.msra.mxu0 0
  %6834 = vmatprep.mubr.bf16.mxu0 0
  %6835 = vmatmul.mubr.bf16.gmra.mrb[0].mxu0 %v6653
  %v6836 = vpop.f32.mrb[0].mxu0
  %v6837 = vadd.f32 %v6620, %v6836
  %v6838 = vpop.f32.mrb[0].mxu0
  %v6839 = vadd.f32 %v6622, %v6838
  %v6840 = vpop.f32.mrb[0].mxu0
  %v6841 = vpop.f32.mrb[0].mxu0
  %6842 = vdwg.mxu0
  %6843 = vrot.lane.b32.xlu0 %v6400, 109
  %v6844 = vpop.permute.xlu0 %6843
  %6845 = vrot.lane.b32.xlu0 %v6401, 109
  %v6846 = vpop.permute.xlu0 %6845
  %6847 = vrot.lane.b32.xlu0 %v6402, 109
  %v6848 = vpop.permute.xlu0 %6847
  %6849 = vrot.lane.b32.xlu0 %v6403, 109
  %v6850 = vpop.permute.xlu0 %6849
  %6851 = vrot.lane.b32.xlu0 %v6404, 109
  %v6852 = vpop.permute.xlu0 %6851
  %6853 = vrot.lane.b32.xlu0 %v6405, 109
  %v6854 = vpop.permute.xlu0 %6853
  %6855 = vrot.lane.b32.xlu0 %v6406, 109
  %v6856 = vpop.permute.xlu0 %6855
  %6857 = vrot.lane.b32.xlu0 %v6407, 109
  %v6858 = vpop.permute.xlu0 %6857
  %6859 = vrot.lane.b32.xlu0 %v6408, 109
  %v6860 = vpop.permute.xlu0 %6859
  %v6861 = vsel %vm590, %v6844, %v6846
  %v6862 = vsel %vm590, %v6846, %v6848
  %v6863 = vsel %vm590, %v6848, %v6850
  %v6864 = vsel %vm590, %v6850, %v6852
  %v6865 = vsel %vm590, %v6852, %v6854
  %v6866 = vsel %vm590, %v6854, %v6856
  %v6867 = vsel %vm590, %v6856, %v6858
  %v6868 = vsel %vm590, %v6858, %v6860
  %v6870 = vsel %vm161, %v6356, 0
  %v6873 = vsel %vm165, %v6861, 0
  %v6876 = vsel %vm165, %v6862, 0
  %v6879 = vsel %vm165, %v6863, 0
  %v6882 = vsel %vm165, %v6864, 0
  %v6885 = vsel %vm165, %v6865, 0
  %v6888 = vsel %vm165, %v6866, 0
  %v6891 = vsel %vm165, %v6867, 0
  %v6894 = vsel %vm165, %v6868, 0
  %6896 = vmatprep.subr.bf16.mxu0 %v6876
  %6897 = vmatpush1.bf16.msra.mxu0 %v6873
  %6898 = vmatprep.subr.bf16.mxu0 0
  %6899 = vmatpush1.bf16.msra.mxu0 0
  %6900 = vmatprep.subr.bf16.mxu0 0
  %6901 = vmatpush1.bf16.msra.mxu0 0
  %6902 = vmatprep.subr.bf16.mxu0 0
  %6903 = vmatpush1.bf16.msra.mxu0 0
  %6904 = vmatprep.subr.bf16.mxu0 0
  %6905 = vmatpush1.bf16.msra.mxu0 0
  %6906 = vmatprep.subr.bf16.mxu0 0
  %6907 = vmatpush1.bf16.msra.mxu0 0
  %6908 = vmatprep.subr.bf16.mxu0 0
  %6909 = vmatpush1.bf16.msra.mxu0 0
  %6910 = vmatprep.subr.bf16.mxu0 0
  %6911 = vmatpush1.bf16.msra.mxu0 0
  %6912 = vmatprep.subr.bf16.mxu0 0
  %6913 = vmatpush1.bf16.msra.mxu0 0
  %6914 = vmatprep.subr.bf16.mxu0 0
  %6915 = vmatpush1.bf16.msra.mxu0 0
  %6916 = vmatprep.subr.bf16.mxu0 0
  %6917 = vmatpush1.bf16.msra.mxu0 0
  %6918 = vmatprep.subr.bf16.mxu0 0
  %6919 = vmatpush1.bf16.msra.mxu0 0
  %6920 = vmatprep.subr.bf16.mxu0 0
  %6921 = vmatpush1.bf16.msra.mxu0 0
  %6922 = vmatprep.subr.bf16.mxu0 0
  %6923 = vmatpush1.bf16.msra.mxu0 0
  %6924 = vmatprep.subr.bf16.mxu0 0
  %6925 = vmatpush1.bf16.msra.mxu0 0
  %6926 = vmatprep.subr.bf16.mxu0 0
  %6927 = vmatpush1.bf16.msra.mxu0 0
  %6928 = vmatprep.mubr.bf16.mxu0 0
  %6929 = vmatmul.mubr.bf16.gmra.mrb[0].mxu0 %v6870
  %v6930 = vpop.f32.mrb[0].mxu0
  %v6931 = vadd.f32 0.0, %v6930
  %v6932 = vpop.f32.mrb[0].mxu0
  %v6933 = vadd.f32 0.0, %v6932
  %v6934 = vpop.f32.mrb[0].mxu0
  %v6935 = vpop.f32.mrb[0].mxu0
  %6936 = vdwg.mxu0
  %6937 = vmatprep.subr.bf16.mxu0 %v6882
  %6938 = vmatpush1.bf16.msra.mxu0 %v6879
  %6939 = vmatprep.subr.bf16.mxu0 0
  %6940 = vmatpush1.bf16.msra.mxu0 0
  %6941 = vmatprep.subr.bf16.mxu0 0
  %6942 = vmatpush1.bf16.msra.mxu0 0
  %6943 = vmatprep.subr.bf16.mxu0 0
  %6944 = vmatpush1.bf16.msra.mxu0 0
  %6945 = vmatprep.subr.bf16.mxu0 0
  %6946 = vmatpush1.bf16.msra.mxu0 0
  %6947 = vmatprep.subr.bf16.mxu0 0
  %6948 = vmatpush1.bf16.msra.mxu0 0
  %6949 = vmatprep.subr.bf16.mxu0 0
  %6950 = vmatpush1.bf16.msra.mxu0 0
  %6951 = vmatprep.subr.bf16.mxu0 0
  %6952 = vmatpush1.bf16.msra.mxu0 0
  %6953 = vmatprep.subr.bf16.mxu0 0
  %6954 = vmatpush1.bf16.msra.mxu0 0
  %6955 = vmatprep.subr.bf16.mxu0 0
  %6956 = vmatpush1.bf16.msra.mxu0 0
  %6957 = vmatprep.subr.bf16.mxu0 0
  %6958 = vmatpush1.bf16.msra.mxu0 0
  %6959 = vmatprep.subr.bf16.mxu0 0
  %6960 = vmatpush1.bf16.msra.mxu0 0
  %6961 = vmatprep.subr.bf16.mxu0 0
  %6962 = vmatpush1.bf16.msra.mxu0 0
  %6963 = vmatprep.subr.bf16.mxu0 0
  %6964 = vmatpush1.bf16.msra.mxu0 0
  %6965 = vmatprep.subr.bf16.mxu0 0
  %6966 = vmatpush1.bf16.msra.mxu0 0
  %6967 = vmatprep.subr.bf16.mxu0 0
  %6968 = vmatpush1.bf16.msra.mxu0 0
  %6969 = vmatprep.mubr.bf16.mxu0 0
  %6970 = vmatmul.mubr.bf16.gmra.mrb[0].mxu0 %v6870
  %v6971 = vpop.f32.mrb[0].mxu0
  %v6972 = vadd.f32 0.0, %v6971
  %v6973 = vpop.f32.mrb[0].mxu0
  %v6974 = vadd.f32 0.0, %v6973
  %v6975 = vpop.f32.mrb[0].mxu0
  %v6976 = vpop.f32.mrb[0].mxu0
  %6977 = vdwg.mxu0
  %6978 = vmatprep.subr.bf16.mxu0 %v6888
  %6979 = vmatpush1.bf16.msra.mxu0 %v6885
  %6980 = vmatprep.subr.bf16.mxu0 0
  %6981 = vmatpush1.bf16.msra.mxu0 0
  %6982 = vmatprep.subr.bf16.mxu0 0
  %6983 = vmatpush1.bf16.msra.mxu0 0
  %6984 = vmatprep.subr.bf16.mxu0 0
  %6985 = vmatpush1.bf16.msra.mxu0 0
  %6986 = vmatprep.subr.bf16.mxu0 0
  %6987 = vmatpush1.bf16.msra.mxu0 0
  %6988 = vmatprep.subr.bf16.mxu0 0
  %6989 = vmatpush1.bf16.msra.mxu0 0
  %6990 = vmatprep.subr.bf16.mxu0 0
  %6991 = vmatpush1.bf16.msra.mxu0 0
  %6992 = vmatprep.subr.bf16.mxu0 0
  %6993 = vmatpush1.bf16.msra.mxu0 0
  %6994 = vmatprep.subr.bf16.mxu0 0
  %6995 = vmatpush1.bf16.msra.mxu0 0
  %6996 = vmatprep.subr.bf16.mxu0 0
  %6997 = vmatpush1.bf16.msra.mxu0 0
  %6998 = vmatprep.subr.bf16.mxu0 0
  %6999 = vmatpush1.bf16.msra.mxu0 0
  %7000 = vmatprep.subr.bf16.mxu0 0
  %7001 = vmatpush1.bf16.msra.mxu0 0
  %7002 = vmatprep.subr.bf16.mxu0 0
  %7003 = vmatpush1.bf16.msra.mxu0 0
  %7004 = vmatprep.subr.bf16.mxu0 0
  %7005 = vmatpush1.bf16.msra.mxu0 0
  %7006 = vmatprep.subr.bf16.mxu0 0
  %7007 = vmatpush1.bf16.msra.mxu0 0
  %7008 = vmatprep.subr.bf16.mxu0 0
  %7009 = vmatpush1.bf16.msra.mxu0 0
  %7010 = vmatprep.mubr.bf16.mxu0 0
  %7011 = vmatmul.mubr.bf16.gmra.mrb[0].mxu0 %v6870
  %v7012 = vpop.f32.mrb[0].mxu0
  %v7013 = vadd.f32 0.0, %v7012
  %v7014 = vpop.f32.mrb[0].mxu0
  %v7015 = vadd.f32 0.0, %v7014
  %v7016 = vpop.f32.mrb[0].mxu0
  %v7017 = vpop.f32.mrb[0].mxu0
  %7018 = vdwg.mxu0
  %7019 = vmatprep.subr.bf16.mxu0 %v6894
  %7020 = vmatpush1.bf16.msra.mxu0 %v6891
  %7021 = vmatprep.subr.bf16.mxu0 0
  %7022 = vmatpush1.bf16.msra.mxu0 0
  %7023 = vmatprep.subr.bf16.mxu0 0
  %7024 = vmatpush1.bf16.msra.mxu0 0
  %7025 = vmatprep.subr.bf16.mxu0 0
  %7026 = vmatpush1.bf16.msra.mxu0 0
  %7027 = vmatprep.subr.bf16.mxu0 0
  %7028 = vmatpush1.bf16.msra.mxu0 0
  %7029 = vmatprep.subr.bf16.mxu0 0
  %7030 = vmatpush1.bf16.msra.mxu0 0
  %7031 = vmatprep.subr.bf16.mxu0 0
  %7032 = vmatpush1.bf16.msra.mxu0 0
  %7033 = vmatprep.subr.bf16.mxu0 0
  %7034 = vmatpush1.bf16.msra.mxu0 0
  %7035 = vmatprep.subr.bf16.mxu0 0
  %7036 = vmatpush1.bf16.msra.mxu0 0
  %7037 = vmatprep.subr.bf16.mxu0 0
  %7038 = vmatpush1.bf16.msra.mxu0 0
  %7039 = vmatprep.subr.bf16.mxu0 0
  %7040 = vmatpush1.bf16.msra.mxu0 0
  %7041 = vmatprep.subr.bf16.mxu0 0
  %7042 = vmatpush1.bf16.msra.mxu0 0
  %7043 = vmatprep.subr.bf16.mxu0 0
  %7044 = vmatpush1.bf16.msra.mxu0 0
  %7045 = vmatprep.subr.bf16.mxu0 0
  %7046 = vmatpush1.bf16.msra.mxu0 0
  %7047 = vmatprep.subr.bf16.mxu0 0
  %7048 = vmatpush1.bf16.msra.mxu0 0
  %7049 = vmatprep.subr.bf16.mxu0 0
  %7050 = vmatpush1.bf16.msra.mxu0 0
  %7051 = vmatprep.mubr.bf16.mxu0 0
  %7052 = vmatmul.mubr.bf16.gmra.mrb[0].mxu0 %v6870
  %v7053 = vpop.f32.mrb[0].mxu0
  %v7054 = vadd.f32 0.0, %v7053
  %v7055 = vpop.f32.mrb[0].mxu0
  %v7056 = vadd.f32 0.0, %v7055
  %v7057 = vpop.f32.mrb[0].mxu0
  %v7058 = vpop.f32.mrb[0].mxu0
  %7059 = vdwg.mxu0
  %v7060 = vadd.f32 %v6714, %v6931
  %v7061 = vadd.f32 %v6716, %v6933
  %v7062 = vadd.f32 %v6755, %v6972
  %v7063 = vadd.f32 %v6757, %v6974
  %v7064 = vadd.f32 %v6796, %v7013
  %v7065 = vadd.f32 %v6798, %v7015
  %v7066 = vadd.f32 %v6837, %v7054
  %v7067 = vadd.f32 %v6839, %v7056
  %7068 = vrot.lane.b32.xlu0 %v6400, 101
  %v7069 = vpop.permute.xlu0 %7068
  %7070 = vrot.lane.b32.xlu0 %v6401, 101
  %v7071 = vpop.permute.xlu0 %7070
  %7072 = vrot.lane.b32.xlu0 %v6402, 101
  %v7073 = vpop.permute.xlu0 %7072
  %7074 = vrot.lane.b32.xlu0 %v6403, 101
  %v7075 = vpop.permute.xlu0 %7074
  %7076 = vrot.lane.b32.xlu0 %v6404, 101
  %v7077 = vpop.permute.xlu0 %7076
  %7078 = vrot.lane.b32.xlu0 %v6405, 101
  %v7079 = vpop.permute.xlu0 %7078
  %7080 = vrot.lane.b32.xlu0 %v6406, 101
  %v7081 = vpop.permute.xlu0 %7080
  %7082 = vrot.lane.b32.xlu0 %v6407, 101
  %v7083 = vpop.permute.xlu0 %7082
  %7084 = vrot.lane.b32.xlu0 %v6408, 101
  %v7085 = vpop.permute.xlu0 %7084
  %v7086 = vsel %vm816, %v7069, %v7071
  %v7087 = vsel %vm816, %v7071, %v7073
  %v7088 = vsel %vm816, %v7073, %v7075
  %v7089 = vsel %vm816, %v7075, %v7077
  %v7090 = vsel %vm816, %v7077, %v7079
  %v7091 = vsel %vm816, %v7079, %v7081
  %v7092 = vsel %vm816, %v7081, %v7083
  %v7093 = vsel %vm816, %v7083, %v7085
  %v7095 = vsel %vm161, %v6357, 0
  %v7098 = vsel %vm165, %v7086, 0
  %v7101 = vsel %vm165, %v7087, 0
  %v7104 = vsel %vm165, %v7088, 0
  %v7107 = vsel %vm165, %v7089, 0
  %v7110 = vsel %vm165, %v7090, 0
  %v7113 = vsel %vm165, %v7091, 0
  %v7116 = vsel %vm165, %v7092, 0
  %v7119 = vsel %vm165, %v7093, 0
  %7121 = vmatprep.subr.bf16.mxu0 %v7101
  %7122 = vmatpush1.bf16.msra.mxu0 %v7098
  %7123 = vmatprep.subr.bf16.mxu0 0
  %7124 = vmatpush1.bf16.msra.mxu0 0
  %7125 = vmatprep.subr.bf16.mxu0 0
  %7126 = vmatpush1.bf16.msra.mxu0 0
  %7127 = vmatprep.subr.bf16.mxu0 0
  %7128 = vmatpush1.bf16.msra.mxu0 0
  %7129 = vmatprep.subr.bf16.mxu0 0
  %7130 = vmatpush1.bf16.msra.mxu0 0
  %7131 = vmatprep.subr.bf16.mxu0 0
  %7132 = vmatpush1.bf16.msra.mxu0 0
  %7133 = vmatprep.subr.bf16.mxu0 0
  %7134 = vmatpush1.bf16.msra.mxu0 0
  %7135 = vmatprep.subr.bf16.mxu0 0
  %7136 = vmatpush1.bf16.msra.mxu0 0
  %7137 = vmatprep.subr.bf16.mxu0 0
  %7138 = vmatpush1.bf16.msra.mxu0 0
  %7139 = vmatprep.subr.bf16.mxu0 0
  %7140 = vmatpush1.bf16.msra.mxu0 0
  %7141 = vmatprep.subr.bf16.mxu0 0
  %7142 = vmatpush1.bf16.msra.mxu0 0
  %7143 = vmatprep.subr.bf16.mxu0 0
  %7144 = vmatpush1.bf16.msra.mxu0 0
  %7145 = vmatprep.subr.bf16.mxu0 0
  %7146 = vmatpush1.bf16.msra.mxu0 0
  %7147 = vmatprep.subr.bf16.mxu0 0
  %7148 = vmatpush1.bf16.msra.mxu0 0
  %7149 = vmatprep.subr.bf16.mxu0 0
  %7150 = vmatpush1.bf16.msra.mxu0 0
  %7151 = vmatprep.subr.bf16.mxu0 0
  %7152 = vmatpush1.bf16.msra.mxu0 0
  %7153 = vmatprep.mubr.bf16.mxu0 0
  %7154 = vmatmul.mubr.bf16.gmra.mrb[0].mxu0 %v7095
  %v7155 = vpop.f32.mrb[0].mxu0
  %v7156 = vadd.f32 0.0, %v7155
  %v7157 = vpop.f32.mrb[0].mxu0
  %v7158 = vadd.f32 0.0, %v7157
  %v7159 = vpop.f32.mrb[0].mxu0
  %v7160 = vpop.f32.mrb[0].mxu0
  %7161 = vdwg.mxu0
  %7162 = vmatprep.subr.bf16.mxu0 %v7107
  %7163 = vmatpush1.bf16.msra.mxu0 %v7104
  %7164 = vmatprep.subr.bf16.mxu0 0
  %7165 = vmatpush1.bf16.msra.mxu0 0
  %7166 = vmatprep.subr.bf16.mxu0 0
  %7167 = vmatpush1.bf16.msra.mxu0 0
  %7168 = vmatprep.subr.bf16.mxu0 0
  %7169 = vmatpush1.bf16.msra.mxu0 0
  %7170 = vmatprep.subr.bf16.mxu0 0
  %7171 = vmatpush1.bf16.msra.mxu0 0
  %7172 = vmatprep.subr.bf16.mxu0 0
  %7173 = vmatpush1.bf16.msra.mxu0 0
  %7174 = vmatprep.subr.bf16.mxu0 0
  %7175 = vmatpush1.bf16.msra.mxu0 0
  %7176 = vmatprep.subr.bf16.mxu0 0
  %7177 = vmatpush1.bf16.msra.mxu0 0
  %7178 = vmatprep.subr.bf16.mxu0 0
  %7179 = vmatpush1.bf16.msra.mxu0 0
  %7180 = vmatprep.subr.bf16.mxu0 0
  %7181 = vmatpush1.bf16.msra.mxu0 0
  %7182 = vmatprep.subr.bf16.mxu0 0
  %7183 = vmatpush1.bf16.msra.mxu0 0
  %7184 = vmatprep.subr.bf16.mxu0 0
  %7185 = vmatpush1.bf16.msra.mxu0 0
  %7186 = vmatprep.subr.bf16.mxu0 0
  %7187 = vmatpush1.bf16.msra.mxu0 0
  %7188 = vmatprep.subr.bf16.mxu0 0
  %7189 = vmatpush1.bf16.msra.mxu0 0
  %7190 = vmatprep.subr.bf16.mxu0 0
  %7191 = vmatpush1.bf16.msra.mxu0 0
  %7192 = vmatprep.subr.bf16.mxu0 0
  %7193 = vmatpush1.bf16.msra.mxu0 0
  %7194 = vmatprep.mubr.bf16.mxu0 0
  %7195 = vmatmul.mubr.bf16.gmra.mrb[0].mxu0 %v7095
  %v7196 = vpop.f32.mrb[0].mxu0
  %v7197 = vadd.f32 0.0, %v7196
  %v7198 = vpop.f32.mrb[0].mxu0
  %v7199 = vadd.f32 0.0, %v7198
  %v7200 = vpop.f32.mrb[0].mxu0
  %v7201 = vpop.f32.mrb[0].mxu0
  %7202 = vdwg.mxu0
  %7203 = vmatprep.subr.bf16.mxu0 %v7113
  %7204 = vmatpush1.bf16.msra.mxu0 %v7110
  %7205 = vmatprep.subr.bf16.mxu0 0
  %7206 = vmatpush1.bf16.msra.mxu0 0
  %7207 = vmatprep.subr.bf16.mxu0 0
  %7208 = vmatpush1.bf16.msra.mxu0 0
  %7209 = vmatprep.subr.bf16.mxu0 0
  %7210 = vmatpush1.bf16.msra.mxu0 0
  %7211 = vmatprep.subr.bf16.mxu0 0
  %7212 = vmatpush1.bf16.msra.mxu0 0
  %7213 = vmatprep.subr.bf16.mxu0 0
  %7214 = vmatpush1.bf16.msra.mxu0 0
  %7215 = vmatprep.subr.bf16.mxu0 0
  %7216 = vmatpush1.bf16.msra.mxu0 0
  %7217 = vmatprep.subr.bf16.mxu0 0
  %7218 = vmatpush1.bf16.msra.mxu0 0
  %7219 = vmatprep.subr.bf16.mxu0 0
  %7220 = vmatpush1.bf16.msra.mxu0 0
  %7221 = vmatprep.subr.bf16.mxu0 0
  %7222 = vmatpush1.bf16.msra.mxu0 0
  %7223 = vmatprep.subr.bf16.mxu0 0
  %7224 = vmatpush1.bf16.msra.mxu0 0
  %7225 = vmatprep.subr.bf16.mxu0 0
  %7226 = vmatpush1.bf16.msra.mxu0 0
  %7227 = vmatprep.subr.bf16.mxu0 0
  %7228 = vmatpush1.bf16.msra.mxu0 0
  %7229 = vmatprep.subr.bf16.mxu0 0
  %7230 = vmatpush1.bf16.msra.mxu0 0
  %7231 = vmatprep.subr.bf16.mxu0 0
  %7232 = vmatpush1.bf16.msra.mxu0 0
  %7233 = vmatprep.subr.bf16.mxu0 0
  %7234 = vmatpush1.bf16.msra.mxu0 0
  %7235 = vmatprep.mubr.bf16.mxu0 0
  %7236 = vmatmul.mubr.bf16.gmra.mrb[0].mxu0 %v7095
  %v7237 = vpop.f32.mrb[0].mxu0
  %v7238 = vadd.f32 0.0, %v7237
  %v7239 = vpop.f32.mrb[0].mxu0
  %v7240 = vadd.f32 0.0, %v7239
  %v7241 = vpop.f32.mrb[0].mxu0
  %v7242 = vpop.f32.mrb[0].mxu0
  %7243 = vdwg.mxu0
  %7244 = vmatprep.subr.bf16.mxu0 %v7119
  %7245 = vmatpush1.bf16.msra.mxu0 %v7116
  %7246 = vmatprep.subr.bf16.mxu0 0
  %7247 = vmatpush1.bf16.msra.mxu0 0
  %7248 = vmatprep.subr.bf16.mxu0 0
  %7249 = vmatpush1.bf16.msra.mxu0 0
  %7250 = vmatprep.subr.bf16.mxu0 0
  %7251 = vmatpush1.bf16.msra.mxu0 0
  %7252 = vmatprep.subr.bf16.mxu0 0
  %7253 = vmatpush1.bf16.msra.mxu0 0
  %7254 = vmatprep.subr.bf16.mxu0 0
  %7255 = vmatpush1.bf16.msra.mxu0 0
  %7256 = vmatprep.subr.bf16.mxu0 0
  %7257 = vmatpush1.bf16.msra.mxu0 0
  %7258 = vmatprep.subr.bf16.mxu0 0
  %7259 = vmatpush1.bf16.msra.mxu0 0
  %7260 = vmatprep.subr.bf16.mxu0 0
  %7261 = vmatpush1.bf16.msra.mxu0 0
  %7262 = vmatprep.subr.bf16.mxu0 0
  %7263 = vmatpush1.bf16.msra.mxu0 0
  %7264 = vmatprep.subr.bf16.mxu0 0
  %7265 = vmatpush1.bf16.msra.mxu0 0
  %7266 = vmatprep.subr.bf16.mxu0 0
  %7267 = vmatpush1.bf16.msra.mxu0 0
  %7268 = vmatprep.subr.bf16.mxu0 0
  %7269 = vmatpush1.bf16.msra.mxu0 0
  %7270 = vmatprep.subr.bf16.mxu0 0
  %7271 = vmatpush1.bf16.msra.mxu0 0
  %7272 = vmatprep.subr.bf16.mxu0 0
  %7273 = vmatpush1.bf16.msra.mxu0 0
  %7274 = vmatprep.subr.bf16.mxu0 0
  %7275 = vmatpush1.bf16.msra.mxu0 0
  %7276 = vmatprep.mubr.bf16.mxu0 0
  %7277 = vmatmul.mubr.bf16.gmra.mrb[0].mxu0 %v7095
  %v7278 = vpop.f32.mrb[0].mxu0
  %v7279 = vadd.f32 0.0, %v7278
  %v7280 = vpop.f32.mrb[0].mxu0
  %v7281 = vadd.f32 0.0, %v7280
  %v7282 = vpop.f32.mrb[0].mxu0
  %v7283 = vpop.f32.mrb[0].mxu0
  %7284 = vdwg.mxu0
  %v7285 = vadd.f32 %v7060, %v7156
  %v7286 = vadd.f32 %v7061, %v7158
  %v7287 = vadd.f32 %v7062, %v7197
  %v7288 = vadd.f32 %v7063, %v7199
  %v7289 = vadd.f32 %v7064, %v7238
  %v7290 = vadd.f32 %v7065, %v7240
  %v7291 = vadd.f32 %v7066, %v7279
  %v7292 = vadd.f32 %v7067, %v7281
  %7293 = vrot.lane.b32.xlu0 %v6400, 100
  %v7294 = vpop.permute.xlu0 %7293
  %7295 = vrot.lane.b32.xlu0 %v6401, 100
  %v7296 = vpop.permute.xlu0 %7295
  %7297 = vrot.lane.b32.xlu0 %v6402, 100
  %v7298 = vpop.permute.xlu0 %7297
  %7299 = vrot.lane.b32.xlu0 %v6403, 100
  %v7300 = vpop.permute.xlu0 %7299
  %7301 = vrot.lane.b32.xlu0 %v6404, 100
  %v7302 = vpop.permute.xlu0 %7301
  %7303 = vrot.lane.b32.xlu0 %v6405, 100
  %v7304 = vpop.permute.xlu0 %7303
  %7305 = vrot.lane.b32.xlu0 %v6406, 100
  %v7306 = vpop.permute.xlu0 %7305
  %7307 = vrot.lane.b32.xlu0 %v6407, 100
  %v7308 = vpop.permute.xlu0 %7307
  %7309 = vrot.lane.b32.xlu0 %v6408, 100
  %v7310 = vpop.permute.xlu0 %7309
  %v7311 = vsel %vm1042, %v7294, %v7296
  %v7312 = vsel %vm1042, %v7296, %v7298
  %v7313 = vsel %vm1042, %v7298, %v7300
  %v7314 = vsel %vm1042, %v7300, %v7302
  %v7315 = vsel %vm1042, %v7302, %v7304
  %v7316 = vsel %vm1042, %v7304, %v7306
  %v7317 = vsel %vm1042, %v7306, %v7308
  %v7318 = vsel %vm1042, %v7308, %v7310
  %v7320 = vsel %vm161, %v6358, 0
  %v7323 = vsel %vm165, %v7311, 0
  %v7326 = vsel %vm165, %v7312, 0
  %v7329 = vsel %vm165, %v7313, 0
  %v7332 = vsel %vm165, %v7314, 0
  %v7335 = vsel %vm165, %v7315, 0
  %v7338 = vsel %vm165, %v7316, 0
  %v7341 = vsel %vm165, %v7317, 0
  %v7344 = vsel %vm165, %v7318, 0
  %7346 = vmatprep.subr.bf16.mxu0 %v7326
  %7347 = vmatpush1.bf16.msra.mxu0 %v7323
  %7348 = vmatprep.subr.bf16.mxu0 0
  %7349 = vmatpush1.bf16.msra.mxu0 0
  %7350 = vmatprep.subr.bf16.mxu0 0
  %7351 = vmatpush1.bf16.msra.mxu0 0
  %7352 = vmatprep.subr.bf16.mxu0 0
  %7353 = vmatpush1.bf16.msra.mxu0 0
  %7354 = vmatprep.subr.bf16.mxu0 0
  %7355 = vmatpush1.bf16.msra.mxu0 0
  %7356 = vmatprep.subr.bf16.mxu0 0
  %7357 = vmatpush1.bf16.msra.mxu0 0
  %7358 = vmatprep.subr.bf16.mxu0 0
  %7359 = vmatpush1.bf16.msra.mxu0 0
  %7360 = vmatprep.subr.bf16.mxu0 0
  %7361 = vmatpush1.bf16.msra.mxu0 0
  %7362 = vmatprep.subr.bf16.mxu0 0
  %7363 = vmatpush1.bf16.msra.mxu0 0
  %7364 = vmatprep.subr.bf16.mxu0 0
  %7365 = vmatpush1.bf16.msra.mxu0 0
  %7366 = vmatprep.subr.bf16.mxu0 0
  %7367 = vmatpush1.bf16.msra.mxu0 0
  %7368 = vmatprep.subr.bf16.mxu0 0
  %7369 = vmatpush1.bf16.msra.mxu0 0
  %7370 = vmatprep.subr.bf16.mxu0 0
  %7371 = vmatpush1.bf16.msra.mxu0 0
  %7372 = vmatprep.subr.bf16.mxu0 0
  %7373 = vmatpush1.bf16.msra.mxu0 0
  %7374 = vmatprep.subr.bf16.mxu0 0
  %7375 = vmatpush1.bf16.msra.mxu0 0
  %7376 = vmatprep.subr.bf16.mxu0 0
  %7377 = vmatpush1.bf16.msra.mxu0 0
  %7378 = vmatprep.mubr.bf16.mxu0 0
  %7379 = vmatmul.mubr.bf16.gmra.mrb[0].mxu0 %v7320
  %v7380 = vpop.f32.mrb[0].mxu0
  %v7381 = vadd.f32 0.0, %v7380
  %v7382 = vpop.f32.mrb[0].mxu0
  %v7383 = vadd.f32 0.0, %v7382
  %v7384 = vpop.f32.mrb[0].mxu0
  %v7385 = vpop.f32.mrb[0].mxu0
  %7386 = vdwg.mxu0
  %7387 = vmatprep.subr.bf16.mxu0 %v7332
  %7388 = vmatpush1.bf16.msra.mxu0 %v7329
  %7389 = vmatprep.subr.bf16.mxu0 0
  %7390 = vmatpush1.bf16.msra.mxu0 0
  %7391 = vmatprep.subr.bf16.mxu0 0
  %7392 = vmatpush1.bf16.msra.mxu0 0
  %7393 = vmatprep.subr.bf16.mxu0 0
  %7394 = vmatpush1.bf16.msra.mxu0 0
  %7395 = vmatprep.subr.bf16.mxu0 0
  %7396 = vmatpush1.bf16.msra.mxu0 0
  %7397 = vmatprep.subr.bf16.mxu0 0
  %7398 = vmatpush1.bf16.msra.mxu0 0
  %7399 = vmatprep.subr.bf16.mxu0 0
  %7400 = vmatpush1.bf16.msra.mxu0 0
  %7401 = vmatprep.subr.bf16.mxu0 0
  %7402 = vmatpush1.bf16.msra.mxu0 0
  %7403 = vmatprep.subr.bf16.mxu0 0
  %7404 = vmatpush1.bf16.msra.mxu0 0
  %7405 = vmatprep.subr.bf16.mxu0 0
  %7406 = vmatpush1.bf16.msra.mxu0 0
  %7407 = vmatprep.subr.bf16.mxu0 0
  %7408 = vmatpush1.bf16.msra.mxu0 0
  %7409 = vmatprep.subr.bf16.mxu0 0
  %7410 = vmatpush1.bf16.msra.mxu0 0
  %7411 = vmatprep.subr.bf16.mxu0 0
  %7412 = vmatpush1.bf16.msra.mxu0 0
  %7413 = vmatprep.subr.bf16.mxu0 0
  %7414 = vmatpush1.bf16.msra.mxu0 0
  %7415 = vmatprep.subr.bf16.mxu0 0
  %7416 = vmatpush1.bf16.msra.mxu0 0
  %7417 = vmatprep.subr.bf16.mxu0 0
  %7418 = vmatpush1.bf16.msra.mxu0 0
  %7419 = vmatprep.mubr.bf16.mxu0 0
  %7420 = vmatmul.mubr.bf16.gmra.mrb[0].mxu0 %v7320
  %v7421 = vpop.f32.mrb[0].mxu0
  %v7422 = vadd.f32 0.0, %v7421
  %v7423 = vpop.f32.mrb[0].mxu0
  %v7424 = vadd.f32 0.0, %v7423
  %v7425 = vpop.f32.mrb[0].mxu0
  %v7426 = vpop.f32.mrb[0].mxu0
  %7427 = vdwg.mxu0
  %7428 = vmatprep.subr.bf16.mxu0 %v7338
  %7429 = vmatpush1.bf16.msra.mxu0 %v7335
  %7430 = vmatprep.subr.bf16.mxu0 0
  %7431 = vmatpush1.bf16.msra.mxu0 0
  %7432 = vmatprep.subr.bf16.mxu0 0
  %7433 = vmatpush1.bf16.msra.mxu0 0
  %7434 = vmatprep.subr.bf16.mxu0 0
  %7435 = vmatpush1.bf16.msra.mxu0 0
  %7436 = vmatprep.subr.bf16.mxu0 0
  %7437 = vmatpush1.bf16.msra.mxu0 0
  %7438 = vmatprep.subr.bf16.mxu0 0
  %7439 = vmatpush1.bf16.msra.mxu0 0
  %7440 = vmatprep.subr.bf16.mxu0 0
  %7441 = vmatpush1.bf16.msra.mxu0 0
  %7442 = vmatprep.subr.bf16.mxu0 0
  %7443 = vmatpush1.bf16.msra.mxu0 0
  %7444 = vmatprep.subr.bf16.mxu0 0
  %7445 = vmatpush1.bf16.msra.mxu0 0
  %7446 = vmatprep.subr.bf16.mxu0 0
  %7447 = vmatpush1.bf16.msra.mxu0 0
  %7448 = vmatprep.subr.bf16.mxu0 0
  %7449 = vmatpush1.bf16.msra.mxu0 0
  %7450 = vmatprep.subr.bf16.mxu0 0
  %7451 = vmatpush1.bf16.msra.mxu0 0
  %7452 = vmatprep.subr.bf16.mxu0 0
  %7453 = vmatpush1.bf16.msra.mxu0 0
  %7454 = vmatprep.subr.bf16.mxu0 0
  %7455 = vmatpush1.bf16.msra.mxu0 0
  %7456 = vmatprep.subr.bf16.mxu0 0
  %7457 = vmatpush1.bf16.msra.mxu0 0
  %7458 = vmatprep.subr.bf16.mxu0 0
  %7459 = vmatpush1.bf16.msra.mxu0 0
  %7460 = vmatprep.mubr.bf16.mxu0 0
  %7461 = vmatmul.mubr.bf16.gmra.mrb[0].mxu0 %v7320
  %v7462 = vpop.f32.mrb[0].mxu0
  %v7463 = vadd.f32 0.0, %v7462
  %v7464 = vpop.f32.mrb[0].mxu0
  %v7465 = vadd.f32 0.0, %v7464
  %v7466 = vpop.f32.mrb[0].mxu0
  %v7467 = vpop.f32.mrb[0].mxu0
  %7468 = vdwg.mxu0
  %7469 = vmatprep.subr.bf16.mxu0 %v7344
  %7470 = vmatpush1.bf16.msra.mxu0 %v7341
  %7471 = vmatprep.subr.bf16.mxu0 0
  %7472 = vmatpush1.bf16.msra.mxu0 0
  %7473 = vmatprep.subr.bf16.mxu0 0
  %7474 = vmatpush1.bf16.msra.mxu0 0
  %7475 = vmatprep.subr.bf16.mxu0 0
  %7476 = vmatpush1.bf16.msra.mxu0 0
  %7477 = vmatprep.subr.bf16.mxu0 0
  %7478 = vmatpush1.bf16.msra.mxu0 0
  %7479 = vmatprep.subr.bf16.mxu0 0
  %7480 = vmatpush1.bf16.msra.mxu0 0
  %7481 = vmatprep.subr.bf16.mxu0 0
  %7482 = vmatpush1.bf16.msra.mxu0 0
  %7483 = vmatprep.subr.bf16.mxu0 0
  %7484 = vmatpush1.bf16.msra.mxu0 0
  %7485 = vmatprep.subr.bf16.mxu0 0
  %7486 = vmatpush1.bf16.msra.mxu0 0
  %7487 = vmatprep.subr.bf16.mxu0 0
  %7488 = vmatpush1.bf16.msra.mxu0 0
  %7489 = vmatprep.subr.bf16.mxu0 0
  %7490 = vmatpush1.bf16.msra.mxu0 0
  %7491 = vmatprep.subr.bf16.mxu0 0
  %7492 = vmatpush1.bf16.msra.mxu0 0
  %7493 = vmatprep.subr.bf16.mxu0 0
  %7494 = vmatpush1.bf16.msra.mxu0 0
  %7495 = vmatprep.subr.bf16.mxu0 0
  %7496 = vmatpush1.bf16.msra.mxu0 0
  %7497 = vmatprep.subr.bf16.mxu0 0
  %7498 = vmatpush1.bf16.msra.mxu0 0
  %7499 = vmatprep.subr.bf16.mxu0 0
  %7500 = vmatpush1.bf16.msra.mxu0 0
  %7501 = vmatprep.mubr.bf16.mxu0 0
  %7502 = vmatmul.mubr.bf16.gmra.mrb[0].mxu0 %v7320
  %v7503 = vpop.f32.mrb[0].mxu0
  %v7504 = vadd.f32 0.0, %v7503
  %v7505 = vpop.f32.mrb[0].mxu0
  %v7506 = vadd.f32 0.0, %v7505
  %v7507 = vpop.f32.mrb[0].mxu0
  %v7508 = vpop.f32.mrb[0].mxu0
  %7509 = vdwg.mxu0
  %v7510 = vadd.f32 %v7285, %v7381
  %v7511 = vadd.f32 %v7286, %v7383
  %v7512 = vadd.f32 %v7287, %v7422
  %v7513 = vadd.f32 %v7288, %v7424
  %v7514 = vadd.f32 %v7289, %v7463
  %v7515 = vadd.f32 %v7290, %v7465
  %v7516 = vadd.f32 %v7291, %v7504
  %v7517 = vadd.f32 %v7292, %v7506
  %7518 = vrot.lane.b32.xlu0 %v6400, 99
  %v7519 = vpop.permute.xlu0 %7518
  %7520 = vrot.lane.b32.xlu0 %v6401, 99
  %v7521 = vpop.permute.xlu0 %7520
  %7522 = vrot.lane.b32.xlu0 %v6402, 99
  %v7523 = vpop.permute.xlu0 %7522
  %7524 = vrot.lane.b32.xlu0 %v6403, 99
  %v7525 = vpop.permute.xlu0 %7524
  %7526 = vrot.lane.b32.xlu0 %v6404, 99
  %v7527 = vpop.permute.xlu0 %7526
  %7528 = vrot.lane.b32.xlu0 %v6405, 99
  %v7529 = vpop.permute.xlu0 %7528
  %7530 = vrot.lane.b32.xlu0 %v6406, 99
  %v7531 = vpop.permute.xlu0 %7530
  %7532 = vrot.lane.b32.xlu0 %v6407, 99
  %v7533 = vpop.permute.xlu0 %7532
  %7534 = vrot.lane.b32.xlu0 %v6408, 99
  %v7535 = vpop.permute.xlu0 %7534
  %v7536 = vsel %vm1268, %v7519, %v7521
  %v7537 = vsel %vm1268, %v7521, %v7523
  %v7538 = vsel %vm1268, %v7523, %v7525
  %v7539 = vsel %vm1268, %v7525, %v7527
  %v7540 = vsel %vm1268, %v7527, %v7529
  %v7541 = vsel %vm1268, %v7529, %v7531
  %v7542 = vsel %vm1268, %v7531, %v7533
  %v7543 = vsel %vm1268, %v7533, %v7535
  %v7545 = vsel %vm161, %v6359, 0
  %v7548 = vsel %vm165, %v7536, 0
  %v7551 = vsel %vm165, %v7537, 0
  %v7554 = vsel %vm165, %v7538, 0
  %v7557 = vsel %vm165, %v7539, 0
  %v7560 = vsel %vm165, %v7540, 0
  %v7563 = vsel %vm165, %v7541, 0
  %v7566 = vsel %vm165, %v7542, 0
  %v7569 = vsel %vm165, %v7543, 0
  %7571 = vmatprep.subr.bf16.mxu0 %v7551
  %7572 = vmatpush1.bf16.msra.mxu0 %v7548
  %7573 = vmatprep.subr.bf16.mxu0 0
  %7574 = vmatpush1.bf16.msra.mxu0 0
  %7575 = vmatprep.subr.bf16.mxu0 0
  %7576 = vmatpush1.bf16.msra.mxu0 0
  %7577 = vmatprep.subr.bf16.mxu0 0
  %7578 = vmatpush1.bf16.msra.mxu0 0
  %7579 = vmatprep.subr.bf16.mxu0 0
  %7580 = vmatpush1.bf16.msra.mxu0 0
  %7581 = vmatprep.subr.bf16.mxu0 0
  %7582 = vmatpush1.bf16.msra.mxu0 0
  %7583 = vmatprep.subr.bf16.mxu0 0
  %7584 = vmatpush1.bf16.msra.mxu0 0
  %7585 = vmatprep.subr.bf16.mxu0 0
  %7586 = vmatpush1.bf16.msra.mxu0 0
  %7587 = vmatprep.subr.bf16.mxu0 0
  %7588 = vmatpush1.bf16.msra.mxu0 0
  %7589 = vmatprep.subr.bf16.mxu0 0
  %7590 = vmatpush1.bf16.msra.mxu0 0
  %7591 = vmatprep.subr.bf16.mxu0 0
  %7592 = vmatpush1.bf16.msra.mxu0 0
  %7593 = vmatprep.subr.bf16.mxu0 0
  %7594 = vmatpush1.bf16.msra.mxu0 0
  %7595 = vmatprep.subr.bf16.mxu0 0
  %7596 = vmatpush1.bf16.msra.mxu0 0
  %7597 = vmatprep.subr.bf16.mxu0 0
  %7598 = vmatpush1.bf16.msra.mxu0 0
  %7599 = vmatprep.subr.bf16.mxu0 0
  %7600 = vmatpush1.bf16.msra.mxu0 0
  %7601 = vmatprep.subr.bf16.mxu0 0
  %7602 = vmatpush1.bf16.msra.mxu0 0
  %7603 = vmatprep.mubr.bf16.mxu0 0
  %7604 = vmatmul.mubr.bf16.gmra.mrb[0].mxu0 %v7545
  %v7605 = vpop.f32.mrb[0].mxu0
  %v7606 = vadd.f32 0.0, %v7605
  %v7607 = vpop.f32.mrb[0].mxu0
  %v7608 = vadd.f32 0.0, %v7607
  %v7609 = vpop.f32.mrb[0].mxu0
  %v7610 = vpop.f32.mrb[0].mxu0
  %7611 = vdwg.mxu0
  %7612 = vmatprep.subr.bf16.mxu0 %v7557
  %7613 = vmatpush1.bf16.msra.mxu0 %v7554
  %7614 = vmatprep.subr.bf16.mxu0 0
  %7615 = vmatpush1.bf16.msra.mxu0 0
  %7616 = vmatprep.subr.bf16.mxu0 0
  %7617 = vmatpush1.bf16.msra.mxu0 0
  %7618 = vmatprep.subr.bf16.mxu0 0
  %7619 = vmatpush1.bf16.msra.mxu0 0
  %7620 = vmatprep.subr.bf16.mxu0 0
  %7621 = vmatpush1.bf16.msra.mxu0 0
  %7622 = vmatprep.subr.bf16.mxu0 0
  %7623 = vmatpush1.bf16.msra.mxu0 0
  %7624 = vmatprep.subr.bf16.mxu0 0
  %7625 = vmatpush1.bf16.msra.mxu0 0
  %7626 = vmatprep.subr.bf16.mxu0 0
  %7627 = vmatpush1.bf16.msra.mxu0 0
  %7628 = vmatprep.subr.bf16.mxu0 0
  %7629 = vmatpush1.bf16.msra.mxu0 0
  %7630 = vmatprep.subr.bf16.mxu0 0
  %7631 = vmatpush1.bf16.msra.mxu0 0
  %7632 = vmatprep.subr.bf16.mxu0 0
  %7633 = vmatpush1.bf16.msra.mxu0 0
  %7634 = vmatprep.subr.bf16.mxu0 0
  %7635 = vmatpush1.bf16.msra.mxu0 0
  %7636 = vmatprep.subr.bf16.mxu0 0
  %7637 = vmatpush1.bf16.msra.mxu0 0
  %7638 = vmatprep.subr.bf16.mxu0 0
  %7639 = vmatpush1.bf16.msra.mxu0 0
  %7640 = vmatprep.subr.bf16.mxu0 0
  %7641 = vmatpush1.bf16.msra.mxu0 0
  %7642 = vmatprep.subr.bf16.mxu0 0
  %7643 = vmatpush1.bf16.msra.mxu0 0
  %7644 = vmatprep.mubr.bf16.mxu0 0
  %7645 = vmatmul.mubr.bf16.gmra.mrb[0].mxu0 %v7545
  %v7646 = vpop.f32.mrb[0].mxu0
  %v7647 = vadd.f32 0.0, %v7646
  %v7648 = vpop.f32.mrb[0].mxu0
  %v7649 = vadd.f32 0.0, %v7648
  %v7650 = vpop.f32.mrb[0].mxu0
  %v7651 = vpop.f32.mrb[0].mxu0
  %7652 = vdwg.mxu0
  %7653 = vmatprep.subr.bf16.mxu0 %v7563
  %7654 = vmatpush1.bf16.msra.mxu0 %v7560
  %7655 = vmatprep.subr.bf16.mxu0 0
  %7656 = vmatpush1.bf16.msra.mxu0 0
  %7657 = vmatprep.subr.bf16.mxu0 0
  %7658 = vmatpush1.bf16.msra.mxu0 0
  %7659 = vmatprep.subr.bf16.mxu0 0
  %7660 = vmatpush1.bf16.msra.mxu0 0
  %7661 = vmatprep.subr.bf16.mxu0 0
  %7662 = vmatpush1.bf16.msra.mxu0 0
  %7663 = vmatprep.subr.bf16.mxu0 0
  %7664 = vmatpush1.bf16.msra.mxu0 0
  %7665 = vmatprep.subr.bf16.mxu0 0
  %7666 = vmatpush1.bf16.msra.mxu0 0
  %7667 = vmatprep.subr.bf16.mxu0 0
  %7668 = vmatpush1.bf16.msra.mxu0 0
  %7669 = vmatprep.subr.bf16.mxu0 0
  %7670 = vmatpush1.bf16.msra.mxu0 0
  %7671 = vmatprep.subr.bf16.mxu0 0
  %7672 = vmatpush1.bf16.msra.mxu0 0
  %7673 = vmatprep.subr.bf16.mxu0 0
  %7674 = vmatpush1.bf16.msra.mxu0 0
  %7675 = vmatprep.subr.bf16.mxu0 0
  %7676 = vmatpush1.bf16.msra.mxu0 0
  %7677 = vmatprep.subr.bf16.mxu0 0
  %7678 = vmatpush1.bf16.msra.mxu0 0
  %7679 = vmatprep.subr.bf16.mxu0 0
  %7680 = vmatpush1.bf16.msra.mxu0 0
  %7681 = vmatprep.subr.bf16.mxu0 0
  %7682 = vmatpush1.bf16.msra.mxu0 0
  %7683 = vmatprep.subr.bf16.mxu0 0
  %7684 = vmatpush1.bf16.msra.mxu0 0
  %7685 = vmatprep.mubr.bf16.mxu0 0
  %7686 = vmatmul.mubr.bf16.gmra.mrb[0].mxu0 %v7545
  %v7687 = vpop.f32.mrb[0].mxu0
  %v7688 = vadd.f32 0.0, %v7687
  %v7689 = vpop.f32.mrb[0].mxu0
  %v7690 = vadd.f32 0.0, %v7689
  %v7691 = vpop.f32.mrb[0].mxu0
  %v7692 = vpop.f32.mrb[0].mxu0
  %7693 = vdwg.mxu0
  %7694 = vmatprep.subr.bf16.mxu0 %v7569
  %7695 = vmatpush1.bf16.msra.mxu0 %v7566
  %7696 = vmatprep.subr.bf16.mxu0 0
  %7697 = vmatpush1.bf16.msra.mxu0 0
  %7698 = vmatprep.subr.bf16.mxu0 0
  %7699 = vmatpush1.bf16.msra.mxu0 0
  %7700 = vmatprep.subr.bf16.mxu0 0
  %7701 = vmatpush1.bf16.msra.mxu0 0
  %7702 = vmatprep.subr.bf16.mxu0 0
  %7703 = vmatpush1.bf16.msra.mxu0 0
  %7704 = vmatprep.subr.bf16.mxu0 0
  %7705 = vmatpush1.bf16.msra.mxu0 0
  %7706 = vmatprep.subr.bf16.mxu0 0
  %7707 = vmatpush1.bf16.msra.mxu0 0
  %7708 = vmatprep.subr.bf16.mxu0 0
  %7709 = vmatpush1.bf16.msra.mxu0 0
  %7710 = vmatprep.subr.bf16.mxu0 0
  %7711 = vmatpush1.bf16.msra.mxu0 0
  %7712 = vmatprep.subr.bf16.mxu0 0
  %7713 = vmatpush1.bf16.msra.mxu0 0
  %7714 = vmatprep.subr.bf16.mxu0 0
  %7715 = vmatpush1.bf16.msra.mxu0 0
  %7716 = vmatprep.subr.bf16.mxu0 0
  %7717 = vmatpush1.bf16.msra.mxu0 0
  %7718 = vmatprep.subr.bf16.mxu0 0
  %7719 = vmatpush1.bf16.msra.mxu0 0
  %7720 = vmatprep.subr.bf16.mxu0 0
  %7721 = vmatpush1.bf16.msra.mxu0 0
  %7722 = vmatprep.subr.bf16.mxu0 0
  %7723 = vmatpush1.bf16.msra.mxu0 0
  %7724 = vmatprep.subr.bf16.mxu0 0
  %7725 = vmatpush1.bf16.msra.mxu0 0
  %7726 = vmatprep.mubr.bf16.mxu0 0
  %7727 = vmatmul.mubr.bf16.gmra.mrb[0].mxu0 %v7545
  %v7728 = vpop.f32.mrb[0].mxu0
  %v7729 = vadd.f32 0.0, %v7728
  %v7730 = vpop.f32.mrb[0].mxu0
  %v7731 = vadd.f32 0.0, %v7730
  %v7732 = vpop.f32.mrb[0].mxu0
  %v7733 = vpop.f32.mrb[0].mxu0
  %7734 = vdwg.mxu0
  %v7735 = vadd.f32 %v7510, %v7606
  %v7736 = vadd.f32 %v7511, %v7608
  %v7737 = vadd.f32 %v7512, %v7647
  %v7738 = vadd.f32 %v7513, %v7649
  %v7739 = vadd.f32 %v7514, %v7688
  %v7740 = vadd.f32 %v7515, %v7690
  %v7741 = vadd.f32 %v7516, %v7729
  %v7742 = vadd.f32 %v7517, %v7731
  %7743 = vrot.lane.b32.xlu0 %v6400, 91
  %v7744 = vpop.permute.xlu0 %7743
  %7745 = vrot.lane.b32.xlu0 %v6401, 91
  %v7746 = vpop.permute.xlu0 %7745
  %7747 = vrot.lane.b32.xlu0 %v6402, 91
  %v7748 = vpop.permute.xlu0 %7747
  %7749 = vrot.lane.b32.xlu0 %v6403, 91
  %v7750 = vpop.permute.xlu0 %7749
  %7751 = vrot.lane.b32.xlu0 %v6404, 91
  %v7752 = vpop.permute.xlu0 %7751
  %7753 = vrot.lane.b32.xlu0 %v6405, 91
  %v7754 = vpop.permute.xlu0 %7753
  %7755 = vrot.lane.b32.xlu0 %v6406, 91
  %v7756 = vpop.permute.xlu0 %7755
  %7757 = vrot.lane.b32.xlu0 %v6407, 91
  %v7758 = vpop.permute.xlu0 %7757
  %7759 = vrot.lane.b32.xlu0 %v6408, 91
  %v7760 = vpop.permute.xlu0 %7759
  %v7761 = vsel %vm1494, %v7744, %v7746
  %v7762 = vsel %vm1494, %v7746, %v7748
  %v7763 = vsel %vm1494, %v7748, %v7750
  %v7764 = vsel %vm1494, %v7750, %v7752
  %v7765 = vsel %vm1494, %v7752, %v7754
  %v7766 = vsel %vm1494, %v7754, %v7756
  %v7767 = vsel %vm1494, %v7756, %v7758
  %v7768 = vsel %vm1494, %v7758, %v7760
  %v7770 = vsel %vm161, %v6360, 0
  %v7773 = vsel %vm165, %v7761, 0
  %v7776 = vsel %vm165, %v7762, 0
  %v7779 = vsel %vm165, %v7763, 0
  %v7782 = vsel %vm165, %v7764, 0
  %v7785 = vsel %vm165, %v7765, 0
  %v7788 = vsel %vm165, %v7766, 0
  %v7791 = vsel %vm165, %v7767, 0
  %v7794 = vsel %vm165, %v7768, 0
  %7796 = vmatprep.subr.bf16.mxu0 %v7776
  %7797 = vmatpush1.bf16.msra.mxu0 %v7773
  %7798 = vmatprep.subr.bf16.mxu0 0
  %7799 = vmatpush1.bf16.msra.mxu0 0
  %7800 = vmatprep.subr.bf16.mxu0 0
  %7801 = vmatpush1.bf16.msra.mxu0 0
  %7802 = vmatprep.subr.bf16.mxu0 0
  %7803 = vmatpush1.bf16.msra.mxu0 0
  %7804 = vmatprep.subr.bf16.mxu0 0
  %7805 = vmatpush1.bf16.msra.mxu0 0
  %7806 = vmatprep.subr.bf16.mxu0 0
  %7807 = vmatpush1.bf16.msra.mxu0 0
  %7808 = vmatprep.subr.bf16.mxu0 0
  %7809 = vmatpush1.bf16.msra.mxu0 0
  %7810 = vmatprep.subr.bf16.mxu0 0
  %7811 = vmatpush1.bf16.msra.mxu0 0
  %7812 = vmatprep.subr.bf16.mxu0 0
  %7813 = vmatpush1.bf16.msra.mxu0 0
  %7814 = vmatprep.subr.bf16.mxu0 0
  %7815 = vmatpush1.bf16.msra.mxu0 0
  %7816 = vmatprep.subr.bf16.mxu0 0
  %7817 = vmatpush1.bf16.msra.mxu0 0
  %7818 = vmatprep.subr.bf16.mxu0 0
  %7819 = vmatpush1.bf16.msra.mxu0 0
  %7820 = vmatprep.subr.bf16.mxu0 0
  %7821 = vmatpush1.bf16.msra.mxu0 0
  %7822 = vmatprep.subr.bf16.mxu0 0
  %7823 = vmatpush1.bf16.msra.mxu0 0
  %7824 = vmatprep.subr.bf16.mxu0 0
  %7825 = vmatpush1.bf16.msra.mxu0 0
  %7826 = vmatprep.subr.bf16.mxu0 0
  %7827 = vmatpush1.bf16.msra.mxu0 0
  %7828 = vmatprep.mubr.bf16.mxu0 0
  %7829 = vmatmul.mubr.bf16.gmra.mrb[0].mxu0 %v7770
  %v7830 = vpop.f32.mrb[0].mxu0
  %v7831 = vadd.f32 0.0, %v7830
  %v7832 = vpop.f32.mrb[0].mxu0
  %v7833 = vadd.f32 0.0, %v7832
  %v7834 = vpop.f32.mrb[0].mxu0
  %v7835 = vpop.f32.mrb[0].mxu0
  %7836 = vdwg.mxu0
  %7837 = vmatprep.subr.bf16.mxu0 %v7782
  %7838 = vmatpush1.bf16.msra.mxu0 %v7779
  %7839 = vmatprep.subr.bf16.mxu0 0
  %7840 = vmatpush1.bf16.msra.mxu0 0
  %7841 = vmatprep.subr.bf16.mxu0 0
  %7842 = vmatpush1.bf16.msra.mxu0 0
  %7843 = vmatprep.subr.bf16.mxu0 0
  %7844 = vmatpush1.bf16.msra.mxu0 0
  %7845 = vmatprep.subr.bf16.mxu0 0
  %7846 = vmatpush1.bf16.msra.mxu0 0
  %7847 = vmatprep.subr.bf16.mxu0 0
  %7848 = vmatpush1.bf16.msra.mxu0 0
  %7849 = vmatprep.subr.bf16.mxu0 0
  %7850 = vmatpush1.bf16.msra.mxu0 0
  %7851 = vmatprep.subr.bf16.mxu0 0
  %7852 = vmatpush1.bf16.msra.mxu0 0
  %7853 = vmatprep.subr.bf16.mxu0 0
  %7854 = vmatpush1.bf16.msra.mxu0 0
  %7855 = vmatprep.subr.bf16.mxu0 0
  %7856 = vmatpush1.bf16.msra.mxu0 0
  %7857 = vmatprep.subr.bf16.mxu0 0
  %7858 = vmatpush1.bf16.msra.mxu0 0
  %7859 = vmatprep.subr.bf16.mxu0 0
  %7860 = vmatpush1.bf16.msra.mxu0 0
  %7861 = vmatprep.subr.bf16.mxu0 0
  %7862 = vmatpush1.bf16.msra.mxu0 0
  %7863 = vmatprep.subr.bf16.mxu0 0
  %7864 = vmatpush1.bf16.msra.mxu0 0
  %7865 = vmatprep.subr.bf16.mxu0 0
  %7866 = vmatpush1.bf16.msra.mxu0 0
  %7867 = vmatprep.subr.bf16.mxu0 0
  %7868 = vmatpush1.bf16.msra.mxu0 0
  %7869 = vmatprep.mubr.bf16.mxu0 0
  %7870 = vmatmul.mubr.bf16.gmra.mrb[0].mxu0 %v7770
  %v7871 = vpop.f32.mrb[0].mxu0
  %v7872 = vadd.f32 0.0, %v7871
  %v7873 = vpop.f32.mrb[0].mxu0
  %v7874 = vadd.f32 0.0, %v7873
  %v7875 = vpop.f32.mrb[0].mxu0
  %v7876 = vpop.f32.mrb[0].mxu0
  %7877 = vdwg.mxu0
  %7878 = vmatprep.subr.bf16.mxu0 %v7788
  %7879 = vmatpush1.bf16.msra.mxu0 %v7785
  %7880 = vmatprep.subr.bf16.mxu0 0
  %7881 = vmatpush1.bf16.msra.mxu0 0
  %7882 = vmatprep.subr.bf16.mxu0 0
  %7883 = vmatpush1.bf16.msra.mxu0 0
  %7884 = vmatprep.subr.bf16.mxu0 0
  %7885 = vmatpush1.bf16.msra.mxu0 0
  %7886 = vmatprep.subr.bf16.mxu0 0
  %7887 = vmatpush1.bf16.msra.mxu0 0
  %7888 = vmatprep.subr.bf16.mxu0 0
  %7889 = vmatpush1.bf16.msra.mxu0 0
  %7890 = vmatprep.subr.bf16.mxu0 0
  %7891 = vmatpush1.bf16.msra.mxu0 0
  %7892 = vmatprep.subr.bf16.mxu0 0
  %7893 = vmatpush1.bf16.msra.mxu0 0
  %7894 = vmatprep.subr.bf16.mxu0 0
  %7895 = vmatpush1.bf16.msra.mxu0 0
  %7896 = vmatprep.subr.bf16.mxu0 0
  %7897 = vmatpush1.bf16.msra.mxu0 0
  %7898 = vmatprep.subr.bf16.mxu0 0
  %7899 = vmatpush1.bf16.msra.mxu0 0
  %7900 = vmatprep.subr.bf16.mxu0 0
  %7901 = vmatpush1.bf16.msra.mxu0 0
  %7902 = vmatprep.subr.bf16.mxu0 0
  %7903 = vmatpush1.bf16.msra.mxu0 0
  %7904 = vmatprep.subr.bf16.mxu0 0
  %7905 = vmatpush1.bf16.msra.mxu0 0
  %7906 = vmatprep.subr.bf16.mxu0 0
  %7907 = vmatpush1.bf16.msra.mxu0 0
  %7908 = vmatprep.subr.bf16.mxu0 0
  %7909 = vmatpush1.bf16.msra.mxu0 0
  %7910 = vmatprep.mubr.bf16.mxu0 0
  %7911 = vmatmul.mubr.bf16.gmra.mrb[0].mxu0 %v7770
  %v7912 = vpop.f32.mrb[0].mxu0
  %v7913 = vadd.f32 0.0, %v7912
  %v7914 = vpop.f32.mrb[0].mxu0
  %v7915 = vadd.f32 0.0, %v7914
  %v7916 = vpop.f32.mrb[0].mxu0
  %v7917 = vpop.f32.mrb[0].mxu0
  %7918 = vdwg.mxu0
  %7919 = vmatprep.subr.bf16.mxu0 %v7794
  %7920 = vmatpush1.bf16.msra.mxu0 %v7791
  %7921 = vmatprep.subr.bf16.mxu0 0
  %7922 = vmatpush1.bf16.msra.mxu0 0
  %7923 = vmatprep.subr.bf16.mxu0 0
  %7924 = vmatpush1.bf16.msra.mxu0 0
  %7925 = vmatprep.subr.bf16.mxu0 0
  %7926 = vmatpush1.bf16.msra.mxu0 0
  %7927 = vmatprep.subr.bf16.mxu0 0
  %7928 = vmatpush1.bf16.msra.mxu0 0
  %7929 = vmatprep.subr.bf16.mxu0 0
  %7930 = vmatpush1.bf16.msra.mxu0 0
  %7931 = vmatprep.subr.bf16.mxu0 0
  %7932 = vmatpush1.bf16.msra.mxu0 0
  %7933 = vmatprep.subr.bf16.mxu0 0
  %7934 = vmatpush1.bf16.msra.mxu0 0
  %7935 = vmatprep.subr.bf16.mxu0 0
  %7936 = vmatpush1.bf16.msra.mxu0 0
  %7937 = vmatprep.subr.bf16.mxu0 0
  %7938 = vmatpush1.bf16.msra.mxu0 0
  %7939 = vmatprep.subr.bf16.mxu0 0
  %7940 = vmatpush1.bf16.msra.mxu0 0
  %7941 = vmatprep.subr.bf16.mxu0 0
  %7942 = vmatpush1.bf16.msra.mxu0 0
  %7943 = vmatprep.subr.bf16.mxu0 0
  %7944 = vmatpush1.bf16.msra.mxu0 0
  %7945 = vmatprep.subr.bf16.mxu0 0
  %7946 = vmatpush1.bf16.msra.mxu0 0
  %7947 = vmatprep.subr.bf16.mxu0 0
  %7948 = vmatpush1.bf16.msra.mxu0 0
  %7949 = vmatprep.subr.bf16.mxu0 0
  %7950 = vmatpush1.bf16.msra.mxu0 0
  %7951 = vmatprep.mubr.bf16.mxu0 0
  %7952 = vmatmul.mubr.bf16.gmra.mrb[0].mxu0 %v7770
  %v7953 = vpop.f32.mrb[0].mxu0
  %v7954 = vadd.f32 0.0, %v7953
  %v7955 = vpop.f32.mrb[0].mxu0
  %v7956 = vadd.f32 0.0, %v7955
  %v7957 = vpop.f32.mrb[0].mxu0
  %v7958 = vpop.f32.mrb[0].mxu0
  %7959 = vdwg.mxu0
  %v7960 = vadd.f32 %v7735, %v7831
  %v7961 = vadd.f32 %v7736, %v7833
  %v7962 = vadd.f32 %v7737, %v7872
  %v7963 = vadd.f32 %v7738, %v7874
  %v7964 = vadd.f32 %v7739, %v7913
  %v7965 = vadd.f32 %v7740, %v7915
  %v7966 = vadd.f32 %v7741, %v7954
  %v7967 = vadd.f32 %v7742, %v7956
  %7968 = vrot.lane.b32.xlu0 %v6400, 90
  %v7969 = vpop.permute.xlu0 %7968
  %7970 = vrot.lane.b32.xlu0 %v6401, 90
  %v7971 = vpop.permute.xlu0 %7970
  %7972 = vrot.lane.b32.xlu0 %v6402, 90
  %v7973 = vpop.permute.xlu0 %7972
  %7974 = vrot.lane.b32.xlu0 %v6403, 90
  %v7975 = vpop.permute.xlu0 %7974
  %7976 = vrot.lane.b32.xlu0 %v6404, 90
  %v7977 = vpop.permute.xlu0 %7976
  %7978 = vrot.lane.b32.xlu0 %v6405, 90
  %v7979 = vpop.permute.xlu0 %7978
  %7980 = vrot.lane.b32.xlu0 %v6406, 90
  %v7981 = vpop.permute.xlu0 %7980
  %7982 = vrot.lane.b32.xlu0 %v6407, 90
  %v7983 = vpop.permute.xlu0 %7982
  %7984 = vrot.lane.b32.xlu0 %v6408, 90
  %v7985 = vpop.permute.xlu0 %7984
  %v7986 = vsel %vm1720, %v7969, %v7971
  %v7987 = vsel %vm1720, %v7971, %v7973
  %v7988 = vsel %vm1720, %v7973, %v7975
  %v7989 = vsel %vm1720, %v7975, %v7977
  %v7990 = vsel %vm1720, %v7977, %v7979
  %v7991 = vsel %vm1720, %v7979, %v7981
  %v7992 = vsel %vm1720, %v7981, %v7983
  %v7993 = vsel %vm1720, %v7983, %v7985
  %v7995 = vsel %vm161, %v6361, 0
  %v7998 = vsel %vm165, %v7986, 0
  %v8001 = vsel %vm165, %v7987, 0
  %v8004 = vsel %vm165, %v7988, 0
  %v8007 = vsel %vm165, %v7989, 0
  %v8010 = vsel %vm165, %v7990, 0
  %v8013 = vsel %vm165, %v7991, 0
  %v8016 = vsel %vm165, %v7992, 0
  %v8019 = vsel %vm165, %v7993, 0
  %8021 = vmatprep.subr.bf16.mxu0 %v8001
  %8022 = vmatpush1.bf16.msra.mxu0 %v7998
  %8023 = vmatprep.subr.bf16.mxu0 0
  %8024 = vmatpush1.bf16.msra.mxu0 0
  %8025 = vmatprep.subr.bf16.mxu0 0
  %8026 = vmatpush1.bf16.msra.mxu0 0
  %8027 = vmatprep.subr.bf16.mxu0 0
  %8028 = vmatpush1.bf16.msra.mxu0 0
  %8029 = vmatprep.subr.bf16.mxu0 0
  %8030 = vmatpush1.bf16.msra.mxu0 0
  %8031 = vmatprep.subr.bf16.mxu0 0
  %8032 = vmatpush1.bf16.msra.mxu0 0
  %8033 = vmatprep.subr.bf16.mxu0 0
  %8034 = vmatpush1.bf16.msra.mxu0 0
  %8035 = vmatprep.subr.bf16.mxu0 0
  %8036 = vmatpush1.bf16.msra.mxu0 0
  %8037 = vmatprep.subr.bf16.mxu0 0
  %8038 = vmatpush1.bf16.msra.mxu0 0
  %8039 = vmatprep.subr.bf16.mxu0 0
  %8040 = vmatpush1.bf16.msra.mxu0 0
  %8041 = vmatprep.subr.bf16.mxu0 0
  %8042 = vmatpush1.bf16.msra.mxu0 0
  %8043 = vmatprep.subr.bf16.mxu0 0
  %8044 = vmatpush1.bf16.msra.mxu0 0
  %8045 = vmatprep.subr.bf16.mxu0 0
  %8046 = vmatpush1.bf16.msra.mxu0 0
  %8047 = vmatprep.subr.bf16.mxu0 0
  %8048 = vmatpush1.bf16.msra.mxu0 0
  %8049 = vmatprep.subr.bf16.mxu0 0
  %8050 = vmatpush1.bf16.msra.mxu0 0
  %8051 = vmatprep.subr.bf16.mxu0 0
  %8052 = vmatpush1.bf16.msra.mxu0 0
  %8053 = vmatprep.mubr.bf16.mxu0 0
  %8054 = vmatmul.mubr.bf16.gmra.mrb[0].mxu0 %v7995
  %v8055 = vpop.f32.mrb[0].mxu0
  %v8056 = vadd.f32 0.0, %v8055
  %v8057 = vpop.f32.mrb[0].mxu0
  %v8058 = vadd.f32 0.0, %v8057
  %v8059 = vpop.f32.mrb[0].mxu0
  %v8060 = vpop.f32.mrb[0].mxu0
  %8061 = vdwg.mxu0
  %8062 = vmatprep.subr.bf16.mxu0 %v8007
  %8063 = vmatpush1.bf16.msra.mxu0 %v8004
  %8064 = vmatprep.subr.bf16.mxu0 0
  %8065 = vmatpush1.bf16.msra.mxu0 0
  %8066 = vmatprep.subr.bf16.mxu0 0
  %8067 = vmatpush1.bf16.msra.mxu0 0
  %8068 = vmatprep.subr.bf16.mxu0 0
  %8069 = vmatpush1.bf16.msra.mxu0 0
  %8070 = vmatprep.subr.bf16.mxu0 0
  %8071 = vmatpush1.bf16.msra.mxu0 0
  %8072 = vmatprep.subr.bf16.mxu0 0
  %8073 = vmatpush1.bf16.msra.mxu0 0
  %8074 = vmatprep.subr.bf16.mxu0 0
  %8075 = vmatpush1.bf16.msra.mxu0 0
  %8076 = vmatprep.subr.bf16.mxu0 0
  %8077 = vmatpush1.bf16.msra.mxu0 0
  %8078 = vmatprep.subr.bf16.mxu0 0
  %8079 = vmatpush1.bf16.msra.mxu0 0
  %8080 = vmatprep.subr.bf16.mxu0 0
  %8081 = vmatpush1.bf16.msra.mxu0 0
  %8082 = vmatprep.subr.bf16.mxu0 0
  %8083 = vmatpush1.bf16.msra.mxu0 0
  %8084 = vmatprep.subr.bf16.mxu0 0
  %8085 = vmatpush1.bf16.msra.mxu0 0
  %8086 = vmatprep.subr.bf16.mxu0 0
  %8087 = vmatpush1.bf16.msra.mxu0 0
  %8088 = vmatprep.subr.bf16.mxu0 0
  %8089 = vmatpush1.bf16.msra.mxu0 0
  %8090 = vmatprep.subr.bf16.mxu0 0
  %8091 = vmatpush1.bf16.msra.mxu0 0
  %8092 = vmatprep.subr.bf16.mxu0 0
  %8093 = vmatpush1.bf16.msra.mxu0 0
  %8094 = vmatprep.mubr.bf16.mxu0 0
  %8095 = vmatmul.mubr.bf16.gmra.mrb[0].mxu0 %v7995
  %v8096 = vpop.f32.mrb[0].mxu0
  %v8097 = vadd.f32 0.0, %v8096
  %v8098 = vpop.f32.mrb[0].mxu0
  %v8099 = vadd.f32 0.0, %v8098
  %v8100 = vpop.f32.mrb[0].mxu0
  %v8101 = vpop.f32.mrb[0].mxu0
  %8102 = vdwg.mxu0
  %8103 = vmatprep.subr.bf16.mxu0 %v8013
  %8104 = vmatpush1.bf16.msra.mxu0 %v8010
  %8105 = vmatprep.subr.bf16.mxu0 0
  %8106 = vmatpush1.bf16.msra.mxu0 0
  %8107 = vmatprep.subr.bf16.mxu0 0
  %8108 = vmatpush1.bf16.msra.mxu0 0
  %8109 = vmatprep.subr.bf16.mxu0 0
  %8110 = vmatpush1.bf16.msra.mxu0 0
  %8111 = vmatprep.subr.bf16.mxu0 0
  %8112 = vmatpush1.bf16.msra.mxu0 0
  %8113 = vmatprep.subr.bf16.mxu0 0
  %8114 = vmatpush1.bf16.msra.mxu0 0
  %8115 = vmatprep.subr.bf16.mxu0 0
  %8116 = vmatpush1.bf16.msra.mxu0 0
  %8117 = vmatprep.subr.bf16.mxu0 0
  %8118 = vmatpush1.bf16.msra.mxu0 0
  %8119 = vmatprep.subr.bf16.mxu0 0
  %8120 = vmatpush1.bf16.msra.mxu0 0
  %8121 = vmatprep.subr.bf16.mxu0 0
  %8122 = vmatpush1.bf16.msra.mxu0 0
  %8123 = vmatprep.subr.bf16.mxu0 0
  %8124 = vmatpush1.bf16.msra.mxu0 0
  %8125 = vmatprep.subr.bf16.mxu0 0
  %8126 = vmatpush1.bf16.msra.mxu0 0
  %8127 = vmatprep.subr.bf16.mxu0 0
  %8128 = vmatpush1.bf16.msra.mxu0 0
  %8129 = vmatprep.subr.bf16.mxu0 0
  %8130 = vmatpush1.bf16.msra.mxu0 0
  %8131 = vmatprep.subr.bf16.mxu0 0
  %8132 = vmatpush1.bf16.msra.mxu0 0
  %8133 = vmatprep.subr.bf16.mxu0 0
  %8134 = vmatpush1.bf16.msra.mxu0 0
  %8135 = vmatprep.mubr.bf16.mxu0 0
  %8136 = vmatmul.mubr.bf16.gmra.mrb[0].mxu0 %v7995
  %v8137 = vpop.f32.mrb[0].mxu0
  %v8138 = vadd.f32 0.0, %v8137
  %v8139 = vpop.f32.mrb[0].mxu0
  %v8140 = vadd.f32 0.0, %v8139
  %v8141 = vpop.f32.mrb[0].mxu0
  %v8142 = vpop.f32.mrb[0].mxu0
  %8143 = vdwg.mxu0
  %8144 = vmatprep.subr.bf16.mxu0 %v8019
  %8145 = vmatpush1.bf16.msra.mxu0 %v8016
  %8146 = vmatprep.subr.bf16.mxu0 0
  %8147 = vmatpush1.bf16.msra.mxu0 0
  %8148 = vmatprep.subr.bf16.mxu0 0
  %8149 = vmatpush1.bf16.msra.mxu0 0
  %8150 = vmatprep.subr.bf16.mxu0 0
  %8151 = vmatpush1.bf16.msra.mxu0 0
  %8152 = vmatprep.subr.bf16.mxu0 0
  %8153 = vmatpush1.bf16.msra.mxu0 0
  %8154 = vmatprep.subr.bf16.mxu0 0
  %8155 = vmatpush1.bf16.msra.mxu0 0
  %8156 = vmatprep.subr.bf16.mxu0 0
  %8157 = vmatpush1.bf16.msra.mxu0 0
  %8158 = vmatprep.subr.bf16.mxu0 0
  %8159 = vmatpush1.bf16.msra.mxu0 0
  %8160 = vmatprep.subr.bf16.mxu0 0
  %8161 = vmatpush1.bf16.msra.mxu0 0
  %8162 = vmatprep.subr.bf16.mxu0 0
  %8163 = vmatpush1.bf16.msra.mxu0 0
  %8164 = vmatprep.subr.bf16.mxu0 0
  %8165 = vmatpush1.bf16.msra.mxu0 0
  %8166 = vmatprep.subr.bf16.mxu0 0
  %8167 = vmatpush1.bf16.msra.mxu0 0
  %8168 = vmatprep.subr.bf16.mxu0 0
  %8169 = vmatpush1.bf16.msra.mxu0 0
  %8170 = vmatprep.subr.bf16.mxu0 0
  %8171 = vmatpush1.bf16.msra.mxu0 0
  %8172 = vmatprep.subr.bf16.mxu0 0
  %8173 = vmatpush1.bf16.msra.mxu0 0
  %8174 = vmatprep.subr.bf16.mxu0 0
  %8175 = vmatpush1.bf16.msra.mxu0 0
  %8176 = vmatprep.mubr.bf16.mxu0 0
  %8177 = vmatmul.mubr.bf16.gmra.mrb[0].mxu0 %v7995
  %v8178 = vpop.f32.mrb[0].mxu0
  %v8179 = vadd.f32 0.0, %v8178
  %v8180 = vpop.f32.mrb[0].mxu0
  %v8181 = vadd.f32 0.0, %v8180
  %v8182 = vpop.f32.mrb[0].mxu0
  %v8183 = vpop.f32.mrb[0].mxu0
  %8184 = vdwg.mxu0
  %v8185 = vadd.f32 %v7960, %v8056
  %v8186 = vadd.f32 %v7961, %v8058
  %v8187 = vadd.f32 %v7962, %v8097
  %v8188 = vadd.f32 %v7963, %v8099
  %v8189 = vadd.f32 %v7964, %v8138
  %v8190 = vadd.f32 %v7965, %v8140
  %v8191 = vadd.f32 %v7966, %v8179
  %v8192 = vadd.f32 %v7967, %v8181
  %8193 = vrot.lane.b32.xlu0 %v6400, 89
  %v8194 = vpop.permute.xlu0 %8193
  %8195 = vrot.lane.b32.xlu0 %v6401, 89
  %v8196 = vpop.permute.xlu0 %8195
  %8197 = vrot.lane.b32.xlu0 %v6402, 89
  %v8198 = vpop.permute.xlu0 %8197
  %8199 = vrot.lane.b32.xlu0 %v6403, 89
  %v8200 = vpop.permute.xlu0 %8199
  %8201 = vrot.lane.b32.xlu0 %v6404, 89
  %v8202 = vpop.permute.xlu0 %8201
  %8203 = vrot.lane.b32.xlu0 %v6405, 89
  %v8204 = vpop.permute.xlu0 %8203
  %8205 = vrot.lane.b32.xlu0 %v6406, 89
  %v8206 = vpop.permute.xlu0 %8205
  %8207 = vrot.lane.b32.xlu0 %v6407, 89
  %v8208 = vpop.permute.xlu0 %8207
  %8209 = vrot.lane.b32.xlu0 %v6408, 89
  %v8210 = vpop.permute.xlu0 %8209
  %v8211 = vsel %vm1946, %v8194, %v8196
  %v8212 = vsel %vm1946, %v8196, %v8198
  %v8213 = vsel %vm1946, %v8198, %v8200
  %v8214 = vsel %vm1946, %v8200, %v8202
  %v8215 = vsel %vm1946, %v8202, %v8204
  %v8216 = vsel %vm1946, %v8204, %v8206
  %v8217 = vsel %vm1946, %v8206, %v8208
  %v8218 = vsel %vm1946, %v8208, %v8210
  %v8220 = vsel %vm161, %v6362, 0
  %v8223 = vsel %vm165, %v8211, 0
  %v8226 = vsel %vm165, %v8212, 0
  %v8229 = vsel %vm165, %v8213, 0
  %v8232 = vsel %vm165, %v8214, 0
  %v8235 = vsel %vm165, %v8215, 0
  %v8238 = vsel %vm165, %v8216, 0
  %v8241 = vsel %vm165, %v8217, 0
  %v8244 = vsel %vm165, %v8218, 0
  %8246 = vmatprep.subr.bf16.mxu0 %v8226
  %8247 = vmatpush1.bf16.msra.mxu0 %v8223
  %8248 = vmatprep.subr.bf16.mxu0 0
  %8249 = vmatpush1.bf16.msra.mxu0 0
  %8250 = vmatprep.subr.bf16.mxu0 0
  %8251 = vmatpush1.bf16.msra.mxu0 0
  %8252 = vmatprep.subr.bf16.mxu0 0
  %8253 = vmatpush1.bf16.msra.mxu0 0
  %8254 = vmatprep.subr.bf16.mxu0 0
  %8255 = vmatpush1.bf16.msra.mxu0 0
  %8256 = vmatprep.subr.bf16.mxu0 0
  %8257 = vmatpush1.bf16.msra.mxu0 0
  %8258 = vmatprep.subr.bf16.mxu0 0
  %8259 = vmatpush1.bf16.msra.mxu0 0
  %8260 = vmatprep.subr.bf16.mxu0 0
  %8261 = vmatpush1.bf16.msra.mxu0 0
  %8262 = vmatprep.subr.bf16.mxu0 0
  %8263 = vmatpush1.bf16.msra.mxu0 0
  %8264 = vmatprep.subr.bf16.mxu0 0
  %8265 = vmatpush1.bf16.msra.mxu0 0
  %8266 = vmatprep.subr.bf16.mxu0 0
  %8267 = vmatpush1.bf16.msra.mxu0 0
  %8268 = vmatprep.subr.bf16.mxu0 0
  %8269 = vmatpush1.bf16.msra.mxu0 0
  %8270 = vmatprep.subr.bf16.mxu0 0
  %8271 = vmatpush1.bf16.msra.mxu0 0
  %8272 = vmatprep.subr.bf16.mxu0 0
  %8273 = vmatpush1.bf16.msra.mxu0 0
  %8274 = vmatprep.subr.bf16.mxu0 0
  %8275 = vmatpush1.bf16.msra.mxu0 0
  %8276 = vmatprep.subr.bf16.mxu0 0
  %8277 = vmatpush1.bf16.msra.mxu0 0
  %8278 = vmatprep.mubr.bf16.mxu0 0
  %8279 = vmatmul.mubr.bf16.gmra.mrb[0].mxu0 %v8220
  %v8280 = vpop.f32.mrb[0].mxu0
  %v8281 = vadd.f32 0.0, %v8280
  %v8282 = vpop.f32.mrb[0].mxu0
  %v8283 = vadd.f32 0.0, %v8282
  %v8284 = vpop.f32.mrb[0].mxu0
  %v8285 = vpop.f32.mrb[0].mxu0
  %8286 = vdwg.mxu0
  %8287 = vmatprep.subr.bf16.mxu0 %v8232
  %8288 = vmatpush1.bf16.msra.mxu0 %v8229
  %8289 = vmatprep.subr.bf16.mxu0 0
  %8290 = vmatpush1.bf16.msra.mxu0 0
  %8291 = vmatprep.subr.bf16.mxu0 0
  %8292 = vmatpush1.bf16.msra.mxu0 0
  %8293 = vmatprep.subr.bf16.mxu0 0
  %8294 = vmatpush1.bf16.msra.mxu0 0
  %8295 = vmatprep.subr.bf16.mxu0 0
  %8296 = vmatpush1.bf16.msra.mxu0 0
  %8297 = vmatprep.subr.bf16.mxu0 0
  %8298 = vmatpush1.bf16.msra.mxu0 0
  %8299 = vmatprep.subr.bf16.mxu0 0
  %8300 = vmatpush1.bf16.msra.mxu0 0
  %8301 = vmatprep.subr.bf16.mxu0 0
  %8302 = vmatpush1.bf16.msra.mxu0 0
  %8303 = vmatprep.subr.bf16.mxu0 0
  %8304 = vmatpush1.bf16.msra.mxu0 0
  %8305 = vmatprep.subr.bf16.mxu0 0
  %8306 = vmatpush1.bf16.msra.mxu0 0
  %8307 = vmatprep.subr.bf16.mxu0 0
  %8308 = vmatpush1.bf16.msra.mxu0 0
  %8309 = vmatprep.subr.bf16.mxu0 0
  %8310 = vmatpush1.bf16.msra.mxu0 0
  %8311 = vmatprep.subr.bf16.mxu0 0
  %8312 = vmatpush1.bf16.msra.mxu0 0
  %8313 = vmatprep.subr.bf16.mxu0 0
  %8314 = vmatpush1.bf16.msra.mxu0 0
  %8315 = vmatprep.subr.bf16.mxu0 0
  %8316 = vmatpush1.bf16.msra.mxu0 0
  %8317 = vmatprep.subr.bf16.mxu0 0
  %8318 = vmatpush1.bf16.msra.mxu0 0
  %8319 = vmatprep.mubr.bf16.mxu0 0
  %8320 = vmatmul.mubr.bf16.gmra.mrb[0].mxu0 %v8220
  %v8321 = vpop.f32.mrb[0].mxu0
  %v8322 = vadd.f32 0.0, %v8321
  %v8323 = vpop.f32.mrb[0].mxu0
  %v8324 = vadd.f32 0.0, %v8323
  %v8325 = vpop.f32.mrb[0].mxu0
  %v8326 = vpop.f32.mrb[0].mxu0
  %8327 = vdwg.mxu0
  %8328 = vmatprep.subr.bf16.mxu0 %v8238
  %8329 = vmatpush1.bf16.msra.mxu0 %v8235
  %8330 = vmatprep.subr.bf16.mxu0 0
  %8331 = vmatpush1.bf16.msra.mxu0 0
  %8332 = vmatprep.subr.bf16.mxu0 0
  %8333 = vmatpush1.bf16.msra.mxu0 0
  %8334 = vmatprep.subr.bf16.mxu0 0
  %8335 = vmatpush1.bf16.msra.mxu0 0
  %8336 = vmatprep.subr.bf16.mxu0 0
  %8337 = vmatpush1.bf16.msra.mxu0 0
  %8338 = vmatprep.subr.bf16.mxu0 0
  %8339 = vmatpush1.bf16.msra.mxu0 0
  %8340 = vmatprep.subr.bf16.mxu0 0
  %8341 = vmatpush1.bf16.msra.mxu0 0
  %8342 = vmatprep.subr.bf16.mxu0 0
  %8343 = vmatpush1.bf16.msra.mxu0 0
  %8344 = vmatprep.subr.bf16.mxu0 0
  %8345 = vmatpush1.bf16.msra.mxu0 0
  %8346 = vmatprep.subr.bf16.mxu0 0
  %8347 = vmatpush1.bf16.msra.mxu0 0
  %8348 = vmatprep.subr.bf16.mxu0 0
  %8349 = vmatpush1.bf16.msra.mxu0 0
  %8350 = vmatprep.subr.bf16.mxu0 0
  %8351 = vmatpush1.bf16.msra.mxu0 0
  %8352 = vmatprep.subr.bf16.mxu0 0
  %8353 = vmatpush1.bf16.msra.mxu0 0
  %8354 = vmatprep.subr.bf16.mxu0 0
  %8355 = vmatpush1.bf16.msra.mxu0 0
  %8356 = vmatprep.subr.bf16.mxu0 0
  %8357 = vmatpush1.bf16.msra.mxu0 0
  %8358 = vmatprep.subr.bf16.mxu0 0
  %8359 = vmatpush1.bf16.msra.mxu0 0
  %8360 = vmatprep.mubr.bf16.mxu0 0
  %8361 = vmatmul.mubr.bf16.gmra.mrb[0].mxu0 %v8220
  %v8362 = vpop.f32.mrb[0].mxu0
  %v8363 = vadd.f32 0.0, %v8362
  %v8364 = vpop.f32.mrb[0].mxu0
  %v8365 = vadd.f32 0.0, %v8364
  %v8366 = vpop.f32.mrb[0].mxu0
  %v8367 = vpop.f32.mrb[0].mxu0
  %8368 = vdwg.mxu0
  %8369 = vmatprep.subr.bf16.mxu0 %v8244
  %8370 = vmatpush1.bf16.msra.mxu0 %v8241
  %8371 = vmatprep.subr.bf16.mxu0 0
  %8372 = vmatpush1.bf16.msra.mxu0 0
  %8373 = vmatprep.subr.bf16.mxu0 0
  %8374 = vmatpush1.bf16.msra.mxu0 0
  %8375 = vmatprep.subr.bf16.mxu0 0
  %8376 = vmatpush1.bf16.msra.mxu0 0
  %8377 = vmatprep.subr.bf16.mxu0 0
  %8378 = vmatpush1.bf16.msra.mxu0 0
  %8379 = vmatprep.subr.bf16.mxu0 0
  %8380 = vmatpush1.bf16.msra.mxu0 0
  %8381 = vmatprep.subr.bf16.mxu0 0
  %8382 = vmatpush1.bf16.msra.mxu0 0
  %8383 = vmatprep.subr.bf16.mxu0 0
  %8384 = vmatpush1.bf16.msra.mxu0 0
  %8385 = vmatprep.subr.bf16.mxu0 0
  %8386 = vmatpush1.bf16.msra.mxu0 0
  %8387 = vmatprep.subr.bf16.mxu0 0
  %8388 = vmatpush1.bf16.msra.mxu0 0
  %8389 = vmatprep.subr.bf16.mxu0 0
  %8390 = vmatpush1.bf16.msra.mxu0 0
  %8391 = vmatprep.subr.bf16.mxu0 0
  %8392 = vmatpush1.bf16.msra.mxu0 0
  %8393 = vmatprep.subr.bf16.mxu0 0
  %8394 = vmatpush1.bf16.msra.mxu0 0
  %8395 = vmatprep.subr.bf16.mxu0 0
  %8396 = vmatpush1.bf16.msra.mxu0 0
  %8397 = vmatprep.subr.bf16.mxu0 0
  %8398 = vmatpush1.bf16.msra.mxu0 0
  %8399 = vmatprep.subr.bf16.mxu0 0
  %8400 = vmatpush1.bf16.msra.mxu0 0
  %8401 = vmatprep.mubr.bf16.mxu0 0
  %8402 = vmatmul.mubr.bf16.gmra.mrb[0].mxu0 %v8220
  %v8403 = vpop.f32.mrb[0].mxu0
  %v8404 = vadd.f32 0.0, %v8403
  %v8405 = vpop.f32.mrb[0].mxu0
  %v8406 = vadd.f32 0.0, %v8405
  %v8407 = vpop.f32.mrb[0].mxu0
  %v8408 = vpop.f32.mrb[0].mxu0
  %8409 = vdwg.mxu0
  %v8410 = vadd.f32 %v8185, %v8281
  %v8411 = vadd.f32 %v8186, %v8283
  %v8412 = vadd.f32 %v8187, %v8322
  %v8413 = vadd.f32 %v8188, %v8324
  %v8414 = vadd.f32 %v8189, %v8363
  %v8415 = vadd.f32 %v8190, %v8365
  %v8416 = vadd.f32 %v8191, %v8404
  %v8417 = vadd.f32 %v8192, %v8406
  %8418 = vrot.lane.b32.xlu0 %v6400, 11
  %v8419 = vpop.permute.xlu0 %8418
  %8420 = vrot.lane.b32.xlu0 %v6401, 11
  %v8421 = vpop.permute.xlu0 %8420
  %8422 = vrot.lane.b32.xlu0 %v6402, 11
  %v8423 = vpop.permute.xlu0 %8422
  %8424 = vrot.lane.b32.xlu0 %v6403, 11
  %v8425 = vpop.permute.xlu0 %8424
  %8426 = vrot.lane.b32.xlu0 %v6404, 11
  %v8427 = vpop.permute.xlu0 %8426
  %8428 = vrot.lane.b32.xlu0 %v6405, 11
  %v8429 = vpop.permute.xlu0 %8428
  %8430 = vrot.lane.b32.xlu0 %v6406, 11
  %v8431 = vpop.permute.xlu0 %8430
  %8432 = vrot.lane.b32.xlu0 %v6407, 11
  %v8433 = vpop.permute.xlu0 %8432
  %8434 = vrot.lane.b32.xlu0 %v6408, 11
  %v8435 = vpop.permute.xlu0 %8434
  %v8436 = vsel %vm2172, %v8419, %v8421
  %v8437 = vsel %vm2172, %v8421, %v8423
  %v8438 = vsel %vm2172, %v8423, %v8425
  %v8439 = vsel %vm2172, %v8425, %v8427
  %v8440 = vsel %vm2172, %v8427, %v8429
  %v8441 = vsel %vm2172, %v8429, %v8431
  %v8442 = vsel %vm2172, %v8431, %v8433
  %v8443 = vsel %vm2172, %v8433, %v8435
  %v8445 = vsel %vm161, %v6363, 0
  %v8448 = vsel %vm165, %v8436, 0
  %v8451 = vsel %vm165, %v8437, 0
  %v8454 = vsel %vm165, %v8438, 0
  %v8457 = vsel %vm165, %v8439, 0
  %v8460 = vsel %vm165, %v8440, 0
  %v8463 = vsel %vm165, %v8441, 0
  %v8466 = vsel %vm165, %v8442, 0
  %v8469 = vsel %vm165, %v8443, 0
  %8471 = vmatprep.subr.bf16.mxu0 %v8451
  %8472 = vmatpush1.bf16.msra.mxu0 %v8448
  %8473 = vmatprep.subr.bf16.mxu0 0
  %8474 = vmatpush1.bf16.msra.mxu0 0
  %8475 = vmatprep.subr.bf16.mxu0 0
  %8476 = vmatpush1.bf16.msra.mxu0 0
  %8477 = vmatprep.subr.bf16.mxu0 0
  %8478 = vmatpush1.bf16.msra.mxu0 0
  %8479 = vmatprep.subr.bf16.mxu0 0
  %8480 = vmatpush1.bf16.msra.mxu0 0
  %8481 = vmatprep.subr.bf16.mxu0 0
  %8482 = vmatpush1.bf16.msra.mxu0 0
  %8483 = vmatprep.subr.bf16.mxu0 0
  %8484 = vmatpush1.bf16.msra.mxu0 0
  %8485 = vmatprep.subr.bf16.mxu0 0
  %8486 = vmatpush1.bf16.msra.mxu0 0
  %8487 = vmatprep.subr.bf16.mxu0 0
  %8488 = vmatpush1.bf16.msra.mxu0 0
  %8489 = vmatprep.subr.bf16.mxu0 0
  %8490 = vmatpush1.bf16.msra.mxu0 0
  %8491 = vmatprep.subr.bf16.mxu0 0
  %8492 = vmatpush1.bf16.msra.mxu0 0
  %8493 = vmatprep.subr.bf16.mxu0 0
  %8494 = vmatpush1.bf16.msra.mxu0 0
  %8495 = vmatprep.subr.bf16.mxu0 0
  %8496 = vmatpush1.bf16.msra.mxu0 0
  %8497 = vmatprep.subr.bf16.mxu0 0
  %8498 = vmatpush1.bf16.msra.mxu0 0
  %8499 = vmatprep.subr.bf16.mxu0 0
  %8500 = vmatpush1.bf16.msra.mxu0 0
  %8501 = vmatprep.subr.bf16.mxu0 0
  %8502 = vmatpush1.bf16.msra.mxu0 0
  %8503 = vmatprep.mubr.bf16.mxu0 0
  %8504 = vmatmul.mubr.bf16.gmra.mrb[0].mxu0 %v8445
  %v8505 = vpop.f32.mrb[0].mxu0
  %v8506 = vadd.f32 0.0, %v8505
  %v8507 = vpop.f32.mrb[0].mxu0
  %v8508 = vadd.f32 0.0, %v8507
  %v8509 = vpop.f32.mrb[0].mxu0
  %v8510 = vpop.f32.mrb[0].mxu0
  %8511 = vdwg.mxu0
  %8512 = vmatprep.subr.bf16.mxu0 %v8457
  %8513 = vmatpush1.bf16.msra.mxu0 %v8454
  %8514 = vmatprep.subr.bf16.mxu0 0
  %8515 = vmatpush1.bf16.msra.mxu0 0
  %8516 = vmatprep.subr.bf16.mxu0 0
  %8517 = vmatpush1.bf16.msra.mxu0 0
  %8518 = vmatprep.subr.bf16.mxu0 0
  %8519 = vmatpush1.bf16.msra.mxu0 0
  %8520 = vmatprep.subr.bf16.mxu0 0
  %8521 = vmatpush1.bf16.msra.mxu0 0
  %8522 = vmatprep.subr.bf16.mxu0 0
  %8523 = vmatpush1.bf16.msra.mxu0 0
  %8524 = vmatprep.subr.bf16.mxu0 0
  %8525 = vmatpush1.bf16.msra.mxu0 0
  %8526 = vmatprep.subr.bf16.mxu0 0
  %8527 = vmatpush1.bf16.msra.mxu0 0
  %8528 = vmatprep.subr.bf16.mxu0 0
  %8529 = vmatpush1.bf16.msra.mxu0 0
  %8530 = vmatprep.subr.bf16.mxu0 0
  %8531 = vmatpush1.bf16.msra.mxu0 0
  %8532 = vmatprep.subr.bf16.mxu0 0
  %8533 = vmatpush1.bf16.msra.mxu0 0
  %8534 = vmatprep.subr.bf16.mxu0 0
  %8535 = vmatpush1.bf16.msra.mxu0 0
  %8536 = vmatprep.subr.bf16.mxu0 0
  %8537 = vmatpush1.bf16.msra.mxu0 0
  %8538 = vmatprep.subr.bf16.mxu0 0
  %8539 = vmatpush1.bf16.msra.mxu0 0
  %8540 = vmatprep.subr.bf16.mxu0 0
  %8541 = vmatpush1.bf16.msra.mxu0 0
  %8542 = vmatprep.subr.bf16.mxu0 0
  %8543 = vmatpush1.bf16.msra.mxu0 0
  %8544 = vmatprep.mubr.bf16.mxu0 0
  %8545 = vmatmul.mubr.bf16.gmra.mrb[0].mxu0 %v8445
  %v8546 = vpop.f32.mrb[0].mxu0
  %v8547 = vadd.f32 0.0, %v8546
  %v8548 = vpop.f32.mrb[0].mxu0
  %v8549 = vadd.f32 0.0, %v8548
  %v8550 = vpop.f32.mrb[0].mxu0
  %v8551 = vpop.f32.mrb[0].mxu0
  %8552 = vdwg.mxu0
  %8553 = vmatprep.subr.bf16.mxu0 %v8463
  %8554 = vmatpush1.bf16.msra.mxu0 %v8460
  %8555 = vmatprep.subr.bf16.mxu0 0
  %8556 = vmatpush1.bf16.msra.mxu0 0
  %8557 = vmatprep.subr.bf16.mxu0 0
  %8558 = vmatpush1.bf16.msra.mxu0 0
  %8559 = vmatprep.subr.bf16.mxu0 0
  %8560 = vmatpush1.bf16.msra.mxu0 0
  %8561 = vmatprep.subr.bf16.mxu0 0
  %8562 = vmatpush1.bf16.msra.mxu0 0
  %8563 = vmatprep.subr.bf16.mxu0 0
  %8564 = vmatpush1.bf16.msra.mxu0 0
  %8565 = vmatprep.subr.bf16.mxu0 0
  %8566 = vmatpush1.bf16.msra.mxu0 0
  %8567 = vmatprep.subr.bf16.mxu0 0
  %8568 = vmatpush1.bf16.msra.mxu0 0
  %8569 = vmatprep.subr.bf16.mxu0 0
  %8570 = vmatpush1.bf16.msra.mxu0 0
  %8571 = vmatprep.subr.bf16.mxu0 0
  %8572 = vmatpush1.bf16.msra.mxu0 0
  %8573 = vmatprep.subr.bf16.mxu0 0
  %8574 = vmatpush1.bf16.msra.mxu0 0
  %8575 = vmatprep.subr.bf16.mxu0 0
  %8576 = vmatpush1.bf16.msra.mxu0 0
  %8577 = vmatprep.subr.bf16.mxu0 0
  %8578 = vmatpush1.bf16.msra.mxu0 0
  %8579 = vmatprep.subr.bf16.mxu0 0
  %8580 = vmatpush1.bf16.msra.mxu0 0
  %8581 = vmatprep.subr.bf16.mxu0 0
  %8582 = vmatpush1.bf16.msra.mxu0 0
  %8583 = vmatprep.subr.bf16.mxu0 0
  %8584 = vmatpush1.bf16.msra.mxu0 0
  %8585 = vmatprep.mubr.bf16.mxu0 0
  %8586 = vmatmul.mubr.bf16.gmra.mrb[0].mxu0 %v8445
  %v8587 = vpop.f32.mrb[0].mxu0
  %v8588 = vadd.f32 0.0, %v8587
  %v8589 = vpop.f32.mrb[0].mxu0
  %v8590 = vadd.f32 0.0, %v8589
  %v8591 = vpop.f32.mrb[0].mxu0
  %v8592 = vpop.f32.mrb[0].mxu0
  %8593 = vdwg.mxu0
  %8594 = vmatprep.subr.bf16.mxu0 %v8469
  %8595 = vmatpush1.bf16.msra.mxu0 %v8466
  %8596 = vmatprep.subr.bf16.mxu0 0
  %8597 = vmatpush1.bf16.msra.mxu0 0
  %8598 = vmatprep.subr.bf16.mxu0 0
  %8599 = vmatpush1.bf16.msra.mxu0 0
  %8600 = vmatprep.subr.bf16.mxu0 0
  %8601 = vmatpush1.bf16.msra.mxu0 0
  %8602 = vmatprep.subr.bf16.mxu0 0
  %8603 = vmatpush1.bf16.msra.mxu0 0
  %8604 = vmatprep.subr.bf16.mxu0 0
  %8605 = vmatpush1.bf16.msra.mxu0 0
  %8606 = vmatprep.subr.bf16.mxu0 0
  %8607 = vmatpush1.bf16.msra.mxu0 0
  %8608 = vmatprep.subr.bf16.mxu0 0
  %8609 = vmatpush1.bf16.msra.mxu0 0
  %8610 = vmatprep.subr.bf16.mxu0 0
  %8611 = vmatpush1.bf16.msra.mxu0 0
  %8612 = vmatprep.subr.bf16.mxu0 0
  %8613 = vmatpush1.bf16.msra.mxu0 0
  %8614 = vmatprep.subr.bf16.mxu0 0
  %8615 = vmatpush1.bf16.msra.mxu0 0
  %8616 = vmatprep.subr.bf16.mxu0 0
  %8617 = vmatpush1.bf16.msra.mxu0 0
  %8618 = vmatprep.subr.bf16.mxu0 0
  %8619 = vmatpush1.bf16.msra.mxu0 0
  %8620 = vmatprep.subr.bf16.mxu0 0
  %8621 = vmatpush1.bf16.msra.mxu0 0
  %8622 = vmatprep.subr.bf16.mxu0 0
  %8623 = vmatpush1.bf16.msra.mxu0 0
  %8624 = vmatprep.subr.bf16.mxu0 0
  %8625 = vmatpush1.bf16.msra.mxu0 0
  %8626 = vmatprep.mubr.bf16.mxu0 0
  %8627 = vmatmul.mubr.bf16.gmra.mrb[0].mxu0 %v8445
  %v8628 = vpop.f32.mrb[0].mxu0
  %v8629 = vadd.f32 0.0, %v8628
  %v8630 = vpop.f32.mrb[0].mxu0
  %v8631 = vadd.f32 0.0, %v8630
  %v8632 = vpop.f32.mrb[0].mxu0
  %v8633 = vpop.f32.mrb[0].mxu0
  %8634 = vdwg.mxu0
  %v8635 = vadd.f32 %v8410, %v8506
  %v8636 = vadd.f32 %v8411, %v8508
  %v8637 = vadd.f32 %v8412, %v8547
  %v8638 = vadd.f32 %v8413, %v8549
  %v8639 = vadd.f32 %v8414, %v8588
  %v8640 = vadd.f32 %v8415, %v8590
  %v8641 = vadd.f32 %v8416, %v8629
  %v8642 = vadd.f32 %v8417, %v8631
  %8643 = vrot.lane.b32.xlu0 %v6400, 10
  %v8644 = vpop.permute.xlu0 %8643
  %8645 = vrot.lane.b32.xlu0 %v6401, 10
  %v8646 = vpop.permute.xlu0 %8645
  %8647 = vrot.lane.b32.xlu0 %v6402, 10
  %v8648 = vpop.permute.xlu0 %8647
  %8649 = vrot.lane.b32.xlu0 %v6403, 10
  %v8650 = vpop.permute.xlu0 %8649
  %8651 = vrot.lane.b32.xlu0 %v6404, 10
  %v8652 = vpop.permute.xlu0 %8651
  %8653 = vrot.lane.b32.xlu0 %v6405, 10
  %v8654 = vpop.permute.xlu0 %8653
  %8655 = vrot.lane.b32.xlu0 %v6406, 10
  %v8656 = vpop.permute.xlu0 %8655
  %8657 = vrot.lane.b32.xlu0 %v6407, 10
  %v8658 = vpop.permute.xlu0 %8657
  %8659 = vrot.lane.b32.xlu0 %v6408, 10
  %v8660 = vpop.permute.xlu0 %8659
  %v8661 = vsel %vm2398, %v8644, %v8646
  %v8662 = vsel %vm2398, %v8646, %v8648
  %v8663 = vsel %vm2398, %v8648, %v8650
  %v8664 = vsel %vm2398, %v8650, %v8652
  %v8665 = vsel %vm2398, %v8652, %v8654
  %v8666 = vsel %vm2398, %v8654, %v8656
  %v8667 = vsel %vm2398, %v8656, %v8658
  %v8668 = vsel %vm2398, %v8658, %v8660
  %v8670 = vsel %vm161, %v6364, 0
  %v8673 = vsel %vm165, %v8661, 0
  %v8676 = vsel %vm165, %v8662, 0
  %v8679 = vsel %vm165, %v8663, 0
  %v8682 = vsel %vm165, %v8664, 0
  %v8685 = vsel %vm165, %v8665, 0
  %v8688 = vsel %vm165, %v8666, 0
  %v8691 = vsel %vm165, %v8667, 0
  %v8694 = vsel %vm165, %v8668, 0
  %8696 = vmatprep.subr.bf16.mxu0 %v8676
  %8697 = vmatpush1.bf16.msra.mxu0 %v8673
  %8698 = vmatprep.subr.bf16.mxu0 0
  %8699 = vmatpush1.bf16.msra.mxu0 0
  %8700 = vmatprep.subr.bf16.mxu0 0
  %8701 = vmatpush1.bf16.msra.mxu0 0
  %8702 = vmatprep.subr.bf16.mxu0 0
  %8703 = vmatpush1.bf16.msra.mxu0 0
  %8704 = vmatprep.subr.bf16.mxu0 0
  %8705 = vmatpush1.bf16.msra.mxu0 0
  %8706 = vmatprep.subr.bf16.mxu0 0
  %8707 = vmatpush1.bf16.msra.mxu0 0
  %8708 = vmatprep.subr.bf16.mxu0 0
  %8709 = vmatpush1.bf16.msra.mxu0 0
  %8710 = vmatprep.subr.bf16.mxu0 0
  %8711 = vmatpush1.bf16.msra.mxu0 0
  %8712 = vmatprep.subr.bf16.mxu0 0
  %8713 = vmatpush1.bf16.msra.mxu0 0
  %8714 = vmatprep.subr.bf16.mxu0 0
  %8715 = vmatpush1.bf16.msra.mxu0 0
  %8716 = vmatprep.subr.bf16.mxu0 0
  %8717 = vmatpush1.bf16.msra.mxu0 0
  %8718 = vmatprep.subr.bf16.mxu0 0
  %8719 = vmatpush1.bf16.msra.mxu0 0
  %8720 = vmatprep.subr.bf16.mxu0 0
  %8721 = vmatpush1.bf16.msra.mxu0 0
  %8722 = vmatprep.subr.bf16.mxu0 0
  %8723 = vmatpush1.bf16.msra.mxu0 0
  %8724 = vmatprep.subr.bf16.mxu0 0
  %8725 = vmatpush1.bf16.msra.mxu0 0
  %8726 = vmatprep.subr.bf16.mxu0 0
  %8727 = vmatpush1.bf16.msra.mxu0 0
  %8728 = vmatprep.mubr.bf16.mxu0 0
  %8729 = vmatmul.mubr.bf16.gmra.mrb[0].mxu0 %v8670
  %v8730 = vpop.f32.mrb[0].mxu0
  %v8731 = vadd.f32 0.0, %v8730
  %v8732 = vpop.f32.mrb[0].mxu0
  %v8733 = vadd.f32 0.0, %v8732
  %v8734 = vpop.f32.mrb[0].mxu0
  %v8735 = vpop.f32.mrb[0].mxu0
  %8736 = vdwg.mxu0
  %8737 = vmatprep.subr.bf16.mxu0 %v8682
  %8738 = vmatpush1.bf16.msra.mxu0 %v8679
  %8739 = vmatprep.subr.bf16.mxu0 0
  %8740 = vmatpush1.bf16.msra.mxu0 0
  %8741 = vmatprep.subr.bf16.mxu0 0
  %8742 = vmatpush1.bf16.msra.mxu0 0
  %8743 = vmatprep.subr.bf16.mxu0 0
  %8744 = vmatpush1.bf16.msra.mxu0 0
  %8745 = vmatprep.subr.bf16.mxu0 0
  %8746 = vmatpush1.bf16.msra.mxu0 0
  %8747 = vmatprep.subr.bf16.mxu0 0
  %8748 = vmatpush1.bf16.msra.mxu0 0
  %8749 = vmatprep.subr.bf16.mxu0 0
  %8750 = vmatpush1.bf16.msra.mxu0 0
  %8751 = vmatprep.subr.bf16.mxu0 0
  %8752 = vmatpush1.bf16.msra.mxu0 0
  %8753 = vmatprep.subr.bf16.mxu0 0
  %8754 = vmatpush1.bf16.msra.mxu0 0
  %8755 = vmatprep.subr.bf16.mxu0 0
  %8756 = vmatpush1.bf16.msra.mxu0 0
  %8757 = vmatprep.subr.bf16.mxu0 0
  %8758 = vmatpush1.bf16.msra.mxu0 0
  %8759 = vmatprep.subr.bf16.mxu0 0
  %8760 = vmatpush1.bf16.msra.mxu0 0
  %8761 = vmatprep.subr.bf16.mxu0 0
  %8762 = vmatpush1.bf16.msra.mxu0 0
  %8763 = vmatprep.subr.bf16.mxu0 0
  %8764 = vmatpush1.bf16.msra.mxu0 0
  %8765 = vmatprep.subr.bf16.mxu0 0
  %8766 = vmatpush1.bf16.msra.mxu0 0
  %8767 = vmatprep.subr.bf16.mxu0 0
  %8768 = vmatpush1.bf16.msra.mxu0 0
  %8769 = vmatprep.mubr.bf16.mxu0 0
  %8770 = vmatmul.mubr.bf16.gmra.mrb[0].mxu0 %v8670
  %v8771 = vpop.f32.mrb[0].mxu0
  %v8772 = vadd.f32 0.0, %v8771
  %v8773 = vpop.f32.mrb[0].mxu0
  %v8774 = vadd.f32 0.0, %v8773
  %v8775 = vpop.f32.mrb[0].mxu0
  %v8776 = vpop.f32.mrb[0].mxu0
  %8777 = vdwg.mxu0
  %8778 = vmatprep.subr.bf16.mxu0 %v8688
  %8779 = vmatpush1.bf16.msra.mxu0 %v8685
  %8780 = vmatprep.subr.bf16.mxu0 0
  %8781 = vmatpush1.bf16.msra.mxu0 0
  %8782 = vmatprep.subr.bf16.mxu0 0
  %8783 = vmatpush1.bf16.msra.mxu0 0
  %8784 = vmatprep.subr.bf16.mxu0 0
  %8785 = vmatpush1.bf16.msra.mxu0 0
  %8786 = vmatprep.subr.bf16.mxu0 0
  %8787 = vmatpush1.bf16.msra.mxu0 0
  %8788 = vmatprep.subr.bf16.mxu0 0
  %8789 = vmatpush1.bf16.msra.mxu0 0
  %8790 = vmatprep.subr.bf16.mxu0 0
  %8791 = vmatpush1.bf16.msra.mxu0 0
  %8792 = vmatprep.subr.bf16.mxu0 0
  %8793 = vmatpush1.bf16.msra.mxu0 0
  %8794 = vmatprep.subr.bf16.mxu0 0
  %8795 = vmatpush1.bf16.msra.mxu0 0
  %8796 = vmatprep.subr.bf16.mxu0 0
  %8797 = vmatpush1.bf16.msra.mxu0 0
  %8798 = vmatprep.subr.bf16.mxu0 0
  %8799 = vmatpush1.bf16.msra.mxu0 0
  %8800 = vmatprep.subr.bf16.mxu0 0
  %8801 = vmatpush1.bf16.msra.mxu0 0
  %8802 = vmatprep.subr.bf16.mxu0 0
  %8803 = vmatpush1.bf16.msra.mxu0 0
  %8804 = vmatprep.subr.bf16.mxu0 0
  %8805 = vmatpush1.bf16.msra.mxu0 0
  %8806 = vmatprep.subr.bf16.mxu0 0
  %8807 = vmatpush1.bf16.msra.mxu0 0
  %8808 = vmatprep.subr.bf16.mxu0 0
  %8809 = vmatpush1.bf16.msra.mxu0 0
  %8810 = vmatprep.mubr.bf16.mxu0 0
  %8811 = vmatmul.mubr.bf16.gmra.mrb[0].mxu0 %v8670
  %v8812 = vpop.f32.mrb[0].mxu0
  %v8813 = vadd.f32 0.0, %v8812
  %v8814 = vpop.f32.mrb[0].mxu0
  %v8815 = vadd.f32 0.0, %v8814
  %v8816 = vpop.f32.mrb[0].mxu0
  %v8817 = vpop.f32.mrb[0].mxu0
  %8818 = vdwg.mxu0
  %8819 = vmatprep.subr.bf16.mxu0 %v8694
  %8820 = vmatpush1.bf16.msra.mxu0 %v8691
  %8821 = vmatprep.subr.bf16.mxu0 0
  %8822 = vmatpush1.bf16.msra.mxu0 0
  %8823 = vmatprep.subr.bf16.mxu0 0
  %8824 = vmatpush1.bf16.msra.mxu0 0
  %8825 = vmatprep.subr.bf16.mxu0 0
  %8826 = vmatpush1.bf16.msra.mxu0 0
  %8827 = vmatprep.subr.bf16.mxu0 0
  %8828 = vmatpush1.bf16.msra.mxu0 0
  %8829 = vmatprep.subr.bf16.mxu0 0
  %8830 = vmatpush1.bf16.msra.mxu0 0
  %8831 = vmatprep.subr.bf16.mxu0 0
  %8832 = vmatpush1.bf16.msra.mxu0 0
  %8833 = vmatprep.subr.bf16.mxu0 0
  %8834 = vmatpush1.bf16.msra.mxu0 0
  %8835 = vmatprep.subr.bf16.mxu0 0
  %8836 = vmatpush1.bf16.msra.mxu0 0
  %8837 = vmatprep.subr.bf16.mxu0 0
  %8838 = vmatpush1.bf16.msra.mxu0 0
  %8839 = vmatprep.subr.bf16.mxu0 0
  %8840 = vmatpush1.bf16.msra.mxu0 0
  %8841 = vmatprep.subr.bf16.mxu0 0
  %8842 = vmatpush1.bf16.msra.mxu0 0
  %8843 = vmatprep.subr.bf16.mxu0 0
  %8844 = vmatpush1.bf16.msra.mxu0 0
  %8845 = vmatprep.subr.bf16.mxu0 0
  %8846 = vmatpush1.bf16.msra.mxu0 0
  %8847 = vmatprep.subr.bf16.mxu0 0
  %8848 = vmatpush1.bf16.msra.mxu0 0
  %8849 = vmatprep.subr.bf16.mxu0 0
  %8850 = vmatpush1.bf16.msra.mxu0 0
  %8851 = vmatprep.mubr.bf16.mxu0 0
  %8852 = vmatmul.mubr.bf16.gmra.mrb[0].mxu0 %v8670
  %v8853 = vpop.f32.mrb[0].mxu0
  %v8854 = vadd.f32 0.0, %v8853
  %v8855 = vpop.f32.mrb[0].mxu0
  %v8856 = vadd.f32 0.0, %v8855
  %v8857 = vpop.f32.mrb[0].mxu0
  %v8858 = vpop.f32.mrb[0].mxu0
  %8859 = vdwg.mxu0
  %v8860 = vadd.f32 %v8635, %v8731
  %v8861 = vadd.f32 %v8636, %v8733
  %v8862 = vadd.f32 %v8637, %v8772
  %v8863 = vadd.f32 %v8638, %v8774
  %v8864 = vadd.f32 %v8639, %v8813
  %v8865 = vadd.f32 %v8640, %v8815
  %v8866 = vadd.f32 %v8641, %v8854
  %v8867 = vadd.f32 %v8642, %v8856
  %8868 = vrot.lane.b32.xlu0 %v6400, 9
  %v8869 = vpop.permute.xlu0 %8868
  %8870 = vrot.lane.b32.xlu0 %v6401, 9
  %v8871 = vpop.permute.xlu0 %8870
  %8872 = vrot.lane.b32.xlu0 %v6402, 9
  %v8873 = vpop.permute.xlu0 %8872
  %8874 = vrot.lane.b32.xlu0 %v6403, 9
  %v8875 = vpop.permute.xlu0 %8874
  %8876 = vrot.lane.b32.xlu0 %v6404, 9
  %v8877 = vpop.permute.xlu0 %8876
  %8878 = vrot.lane.b32.xlu0 %v6405, 9
  %v8879 = vpop.permute.xlu0 %8878
  %8880 = vrot.lane.b32.xlu0 %v6406, 9
  %v8881 = vpop.permute.xlu0 %8880
  %8882 = vrot.lane.b32.xlu0 %v6407, 9
  %v8883 = vpop.permute.xlu0 %8882
  %8884 = vrot.lane.b32.xlu0 %v6408, 9
  %v8885 = vpop.permute.xlu0 %8884
  %v8886 = vsel %vm2624, %v8869, %v8871
  %v8887 = vsel %vm2624, %v8871, %v8873
  %v8888 = vsel %vm2624, %v8873, %v8875
  %v8889 = vsel %vm2624, %v8875, %v8877
  %v8890 = vsel %vm2624, %v8877, %v8879
  %v8891 = vsel %vm2624, %v8879, %v8881
  %v8892 = vsel %vm2624, %v8881, %v8883
  %v8893 = vsel %vm2624, %v8883, %v8885
  %v8895 = vsel %vm161, %v6365, 0
  %v8898 = vsel %vm165, %v8886, 0
  %v8901 = vsel %vm165, %v8887, 0
  %v8904 = vsel %vm165, %v8888, 0
  %v8907 = vsel %vm165, %v8889, 0
  %v8910 = vsel %vm165, %v8890, 0
  %v8913 = vsel %vm165, %v8891, 0
  %v8916 = vsel %vm165, %v8892, 0
  %v8919 = vsel %vm165, %v8893, 0
  %8921 = vmatprep.subr.bf16.mxu0 %v8901
  %8922 = vmatpush1.bf16.msra.mxu0 %v8898
  %8923 = vmatprep.subr.bf16.mxu0 0
  %8924 = vmatpush1.bf16.msra.mxu0 0
  %8925 = vmatprep.subr.bf16.mxu0 0
  %8926 = vmatpush1.bf16.msra.mxu0 0
  %8927 = vmatprep.subr.bf16.mxu0 0
  %8928 = vmatpush1.bf16.msra.mxu0 0
  %8929 = vmatprep.subr.bf16.mxu0 0
  %8930 = vmatpush1.bf16.msra.mxu0 0
  %8931 = vmatprep.subr.bf16.mxu0 0
  %8932 = vmatpush1.bf16.msra.mxu0 0
  %8933 = vmatprep.subr.bf16.mxu0 0
  %8934 = vmatpush1.bf16.msra.mxu0 0
  %8935 = vmatprep.subr.bf16.mxu0 0
  %8936 = vmatpush1.bf16.msra.mxu0 0
  %8937 = vmatprep.subr.bf16.mxu0 0
  %8938 = vmatpush1.bf16.msra.mxu0 0
  %8939 = vmatprep.subr.bf16.mxu0 0
  %8940 = vmatpush1.bf16.msra.mxu0 0
  %8941 = vmatprep.subr.bf16.mxu0 0
  %8942 = vmatpush1.bf16.msra.mxu0 0
  %8943 = vmatprep.subr.bf16.mxu0 0
  %8944 = vmatpush1.bf16.msra.mxu0 0
  %8945 = vmatprep.subr.bf16.mxu0 0
  %8946 = vmatpush1.bf16.msra.mxu0 0
  %8947 = vmatprep.subr.bf16.mxu0 0
  %8948 = vmatpush1.bf16.msra.mxu0 0
  %8949 = vmatprep.subr.bf16.mxu0 0
  %8950 = vmatpush1.bf16.msra.mxu0 0
  %8951 = vmatprep.subr.bf16.mxu0 0
  %8952 = vmatpush1.bf16.msra.mxu0 0
  %8953 = vmatprep.mubr.bf16.mxu0 0
  %8954 = vmatmul.mubr.bf16.gmra.mrb[0].mxu0 %v8895
  %v8955 = vpop.f32.mrb[0].mxu0
  %v8956 = vadd.f32 0.0, %v8955
  %v8957 = vpop.f32.mrb[0].mxu0
  %v8958 = vadd.f32 0.0, %v8957
  %v8959 = vpop.f32.mrb[0].mxu0
  %v8960 = vpop.f32.mrb[0].mxu0
  %8961 = vdwg.mxu0
  %8962 = vmatprep.subr.bf16.mxu0 %v8907
  %8963 = vmatpush1.bf16.msra.mxu0 %v8904
  %8964 = vmatprep.subr.bf16.mxu0 0
  %8965 = vmatpush1.bf16.msra.mxu0 0
  %8966 = vmatprep.subr.bf16.mxu0 0
  %8967 = vmatpush1.bf16.msra.mxu0 0
  %8968 = vmatprep.subr.bf16.mxu0 0
  %8969 = vmatpush1.bf16.msra.mxu0 0
  %8970 = vmatprep.subr.bf16.mxu0 0
  %8971 = vmatpush1.bf16.msra.mxu0 0
  %8972 = vmatprep.subr.bf16.mxu0 0
  %8973 = vmatpush1.bf16.msra.mxu0 0
  %8974 = vmatprep.subr.bf16.mxu0 0
  %8975 = vmatpush1.bf16.msra.mxu0 0
  %8976 = vmatprep.subr.bf16.mxu0 0
  %8977 = vmatpush1.bf16.msra.mxu0 0
  %8978 = vmatprep.subr.bf16.mxu0 0
  %8979 = vmatpush1.bf16.msra.mxu0 0
  %8980 = vmatprep.subr.bf16.mxu0 0
  %8981 = vmatpush1.bf16.msra.mxu0 0
  %8982 = vmatprep.subr.bf16.mxu0 0
  %8983 = vmatpush1.bf16.msra.mxu0 0
  %8984 = vmatprep.subr.bf16.mxu0 0
  %8985 = vmatpush1.bf16.msra.mxu0 0
  %8986 = vmatprep.subr.bf16.mxu0 0
  %8987 = vmatpush1.bf16.msra.mxu0 0
  %8988 = vmatprep.subr.bf16.mxu0 0
  %8989 = vmatpush1.bf16.msra.mxu0 0
  %8990 = vmatprep.subr.bf16.mxu0 0
  %8991 = vmatpush1.bf16.msra.mxu0 0
  %8992 = vmatprep.subr.bf16.mxu0 0
  %8993 = vmatpush1.bf16.msra.mxu0 0
  %8994 = vmatprep.mubr.bf16.mxu0 0
  %8995 = vmatmul.mubr.bf16.gmra.mrb[0].mxu0 %v8895
  %v8996 = vpop.f32.mrb[0].mxu0
  %v8997 = vadd.f32 0.0, %v8996
  %v8998 = vpop.f32.mrb[0].mxu0
  %v8999 = vadd.f32 0.0, %v8998
  %v9000 = vpop.f32.mrb[0].mxu0
  %v9001 = vpop.f32.mrb[0].mxu0
  %9002 = vdwg.mxu0
  %9003 = vmatprep.subr.bf16.mxu0 %v8913
  %9004 = vmatpush1.bf16.msra.mxu0 %v8910
  %9005 = vmatprep.subr.bf16.mxu0 0
  %9006 = vmatpush1.bf16.msra.mxu0 0
  %9007 = vmatprep.subr.bf16.mxu0 0
  %9008 = vmatpush1.bf16.msra.mxu0 0
  %9009 = vmatprep.subr.bf16.mxu0 0
  %9010 = vmatpush1.bf16.msra.mxu0 0
  %9011 = vmatprep.subr.bf16.mxu0 0
  %9012 = vmatpush1.bf16.msra.mxu0 0
  %9013 = vmatprep.subr.bf16.mxu0 0
  %9014 = vmatpush1.bf16.msra.mxu0 0
  %9015 = vmatprep.subr.bf16.mxu0 0
  %9016 = vmatpush1.bf16.msra.mxu0 0
  %9017 = vmatprep.subr.bf16.mxu0 0
  %9018 = vmatpush1.bf16.msra.mxu0 0
  %9019 = vmatprep.subr.bf16.mxu0 0
  %9020 = vmatpush1.bf16.msra.mxu0 0
  %9021 = vmatprep.subr.bf16.mxu0 0
  %9022 = vmatpush1.bf16.msra.mxu0 0
  %9023 = vmatprep.subr.bf16.mxu0 0
  %9024 = vmatpush1.bf16.msra.mxu0 0
  %9025 = vmatprep.subr.bf16.mxu0 0
  %9026 = vmatpush1.bf16.msra.mxu0 0
  %9027 = vmatprep.subr.bf16.mxu0 0
  %9028 = vmatpush1.bf16.msra.mxu0 0
  %9029 = vmatprep.subr.bf16.mxu0 0
  %9030 = vmatpush1.bf16.msra.mxu0 0
  %9031 = vmatprep.subr.bf16.mxu0 0
  %9032 = vmatpush1.bf16.msra.mxu0 0
  %9033 = vmatprep.subr.bf16.mxu0 0
  %9034 = vmatpush1.bf16.msra.mxu0 0
  %9035 = vmatprep.mubr.bf16.mxu0 0
  %9036 = vmatmul.mubr.bf16.gmra.mrb[0].mxu0 %v8895
  %v9037 = vpop.f32.mrb[0].mxu0
  %v9038 = vadd.f32 0.0, %v9037
  %v9039 = vpop.f32.mrb[0].mxu0
  %v9040 = vadd.f32 0.0, %v9039
  %v9041 = vpop.f32.mrb[0].mxu0
  %v9042 = vpop.f32.mrb[0].mxu0
  %9043 = vdwg.mxu0
  %9044 = vmatprep.subr.bf16.mxu0 %v8919
  %9045 = vmatpush1.bf16.msra.mxu0 %v8916
  %9046 = vmatprep.subr.bf16.mxu0 0
  %9047 = vmatpush1.bf16.msra.mxu0 0
  %9048 = vmatprep.subr.bf16.mxu0 0
  %9049 = vmatpush1.bf16.msra.mxu0 0
  %9050 = vmatprep.subr.bf16.mxu0 0
  %9051 = vmatpush1.bf16.msra.mxu0 0
  %9052 = vmatprep.subr.bf16.mxu0 0
  %9053 = vmatpush1.bf16.msra.mxu0 0
  %9054 = vmatprep.subr.bf16.mxu0 0
  %9055 = vmatpush1.bf16.msra.mxu0 0
  %9056 = vmatprep.subr.bf16.mxu0 0
  %9057 = vmatpush1.bf16.msra.mxu0 0
  %9058 = vmatprep.subr.bf16.mxu0 0
  %9059 = vmatpush1.bf16.msra.mxu0 0
  %9060 = vmatprep.subr.bf16.mxu0 0
  %9061 = vmatpush1.bf16.msra.mxu0 0
  %9062 = vmatprep.subr.bf16.mxu0 0
  %9063 = vmatpush1.bf16.msra.mxu0 0
  %9064 = vmatprep.subr.bf16.mxu0 0
  %9065 = vmatpush1.bf16.msra.mxu0 0
  %9066 = vmatprep.subr.bf16.mxu0 0
  %9067 = vmatpush1.bf16.msra.mxu0 0
  %9068 = vmatprep.subr.bf16.mxu0 0
  %9069 = vmatpush1.bf16.msra.mxu0 0
  %9070 = vmatprep.subr.bf16.mxu0 0
  %9071 = vmatpush1.bf16.msra.mxu0 0
  %9072 = vmatprep.subr.bf16.mxu0 0
  %9073 = vmatpush1.bf16.msra.mxu0 0
  %9074 = vmatprep.subr.bf16.mxu0 0
  %9075 = vmatpush1.bf16.msra.mxu0 0
  %9076 = vmatprep.mubr.bf16.mxu0 0
  %9077 = vmatmul.mubr.bf16.gmra.mrb[0].mxu0 %v8895
  %v9078 = vpop.f32.mrb[0].mxu0
  %v9079 = vadd.f32 0.0, %v9078
  %v9080 = vpop.f32.mrb[0].mxu0
  %v9081 = vadd.f32 0.0, %v9080
  %v9082 = vpop.f32.mrb[0].mxu0
  %v9083 = vpop.f32.mrb[0].mxu0
  %9084 = vdwg.mxu0
  %v9085 = vadd.f32 %v8860, %v8956
  %v9086 = vadd.f32 %v8861, %v8958
  %v9087 = vadd.f32 %v8862, %v8997
  %v9088 = vadd.f32 %v8863, %v8999
  %v9089 = vadd.f32 %v8864, %v9038
  %v9090 = vadd.f32 %v8865, %v9040
  %v9091 = vadd.f32 %v8866, %v9079
  %v9092 = vadd.f32 %v8867, %v9081
  %9093 = vrot.lane.b32.xlu0 %v6400, 1
  %v9094 = vpop.permute.xlu0 %9093
  %9095 = vrot.lane.b32.xlu0 %v6401, 1
  %v9096 = vpop.permute.xlu0 %9095
  %9097 = vrot.lane.b32.xlu0 %v6402, 1
  %v9098 = vpop.permute.xlu0 %9097
  %9099 = vrot.lane.b32.xlu0 %v6403, 1
  %v9100 = vpop.permute.xlu0 %9099
  %9101 = vrot.lane.b32.xlu0 %v6404, 1
  %v9102 = vpop.permute.xlu0 %9101
  %9103 = vrot.lane.b32.xlu0 %v6405, 1
  %v9104 = vpop.permute.xlu0 %9103
  %9105 = vrot.lane.b32.xlu0 %v6406, 1
  %v9106 = vpop.permute.xlu0 %9105
  %9107 = vrot.lane.b32.xlu0 %v6407, 1
  %v9108 = vpop.permute.xlu0 %9107
  %9109 = vrot.lane.b32.xlu0 %v6408, 1
  %v9110 = vpop.permute.xlu0 %9109
  %v9111 = vsel %vm2850, %v9094, %v9096
  %v9112 = vsel %vm2850, %v9096, %v9098
  %v9113 = vsel %vm2850, %v9098, %v9100
  %v9114 = vsel %vm2850, %v9100, %v9102
  %v9115 = vsel %vm2850, %v9102, %v9104
  %v9116 = vsel %vm2850, %v9104, %v9106
  %v9117 = vsel %vm2850, %v9106, %v9108
  %v9118 = vsel %vm2850, %v9108, %v9110
  %v9120 = vsel %vm161, %v6366, 0
  %v9123 = vsel %vm165, %v9111, 0
  %v9126 = vsel %vm165, %v9112, 0
  %v9129 = vsel %vm165, %v9113, 0
  %v9132 = vsel %vm165, %v9114, 0
  %v9135 = vsel %vm165, %v9115, 0
  %v9138 = vsel %vm165, %v9116, 0
  %v9141 = vsel %vm165, %v9117, 0
  %v9144 = vsel %vm165, %v9118, 0
  %9146 = vmatprep.subr.bf16.mxu0 %v9126
  %9147 = vmatpush1.bf16.msra.mxu0 %v9123
  %9148 = vmatprep.subr.bf16.mxu0 0
  %9149 = vmatpush1.bf16.msra.mxu0 0
  %9150 = vmatprep.subr.bf16.mxu0 0
  %9151 = vmatpush1.bf16.msra.mxu0 0
  %9152 = vmatprep.subr.bf16.mxu0 0
  %9153 = vmatpush1.bf16.msra.mxu0 0
  %9154 = vmatprep.subr.bf16.mxu0 0
  %9155 = vmatpush1.bf16.msra.mxu0 0
  %9156 = vmatprep.subr.bf16.mxu0 0
  %9157 = vmatpush1.bf16.msra.mxu0 0
  %9158 = vmatprep.subr.bf16.mxu0 0
  %9159 = vmatpush1.bf16.msra.mxu0 0
  %9160 = vmatprep.subr.bf16.mxu0 0
  %9161 = vmatpush1.bf16.msra.mxu0 0
  %9162 = vmatprep.subr.bf16.mxu0 0
  %9163 = vmatpush1.bf16.msra.mxu0 0
  %9164 = vmatprep.subr.bf16.mxu0 0
  %9165 = vmatpush1.bf16.msra.mxu0 0
  %9166 = vmatprep.subr.bf16.mxu0 0
  %9167 = vmatpush1.bf16.msra.mxu0 0
  %9168 = vmatprep.subr.bf16.mxu0 0
  %9169 = vmatpush1.bf16.msra.mxu0 0
  %9170 = vmatprep.subr.bf16.mxu0 0
  %9171 = vmatpush1.bf16.msra.mxu0 0
  %9172 = vmatprep.subr.bf16.mxu0 0
  %9173 = vmatpush1.bf16.msra.mxu0 0
  %9174 = vmatprep.subr.bf16.mxu0 0
  %9175 = vmatpush1.bf16.msra.mxu0 0
  %9176 = vmatprep.subr.bf16.mxu0 0
  %9177 = vmatpush1.bf16.msra.mxu0 0
  %9178 = vmatprep.mubr.bf16.mxu0 0
  %9179 = vmatmul.mubr.bf16.gmra.mrb[0].mxu0 %v9120
  %v9180 = vpop.f32.mrb[0].mxu0
  %v9181 = vadd.f32 0.0, %v9180
  %v9182 = vpop.f32.mrb[0].mxu0
  %v9183 = vadd.f32 0.0, %v9182
  %v9184 = vpop.f32.mrb[0].mxu0
  %v9185 = vpop.f32.mrb[0].mxu0
  %9186 = vdwg.mxu0
  %9187 = vmatprep.subr.bf16.mxu0 %v9132
  %9188 = vmatpush1.bf16.msra.mxu0 %v9129
  %9189 = vmatprep.subr.bf16.mxu0 0
  %9190 = vmatpush1.bf16.msra.mxu0 0
  %9191 = vmatprep.subr.bf16.mxu0 0
  %9192 = vmatpush1.bf16.msra.mxu0 0
  %9193 = vmatprep.subr.bf16.mxu0 0
  %9194 = vmatpush1.bf16.msra.mxu0 0
  %9195 = vmatprep.subr.bf16.mxu0 0
  %9196 = vmatpush1.bf16.msra.mxu0 0
  %9197 = vmatprep.subr.bf16.mxu0 0
  %9198 = vmatpush1.bf16.msra.mxu0 0
  %9199 = vmatprep.subr.bf16.mxu0 0
  %9200 = vmatpush1.bf16.msra.mxu0 0
  %9201 = vmatprep.subr.bf16.mxu0 0
  %9202 = vmatpush1.bf16.msra.mxu0 0
  %9203 = vmatprep.subr.bf16.mxu0 0
  %9204 = vmatpush1.bf16.msra.mxu0 0
  %9205 = vmatprep.subr.bf16.mxu0 0
  %9206 = vmatpush1.bf16.msra.mxu0 0
  %9207 = vmatprep.subr.bf16.mxu0 0
  %9208 = vmatpush1.bf16.msra.mxu0 0
  %9209 = vmatprep.subr.bf16.mxu0 0
  %9210 = vmatpush1.bf16.msra.mxu0 0
  %9211 = vmatprep.subr.bf16.mxu0 0
  %9212 = vmatpush1.bf16.msra.mxu0 0
  %9213 = vmatprep.subr.bf16.mxu0 0
  %9214 = vmatpush1.bf16.msra.mxu0 0
  %9215 = vmatprep.subr.bf16.mxu0 0
  %9216 = vmatpush1.bf16.msra.mxu0 0
  %9217 = vmatprep.subr.bf16.mxu0 0
  %9218 = vmatpush1.bf16.msra.mxu0 0
  %9219 = vmatprep.mubr.bf16.mxu0 0
  %9220 = vmatmul.mubr.bf16.gmra.mrb[0].mxu0 %v9120
  %v9221 = vpop.f32.mrb[0].mxu0
  %v9222 = vadd.f32 0.0, %v9221
  %v9223 = vpop.f32.mrb[0].mxu0
  %v9224 = vadd.f32 0.0, %v9223
  %v9225 = vpop.f32.mrb[0].mxu0
  %v9226 = vpop.f32.mrb[0].mxu0
  %9227 = vdwg.mxu0
  %9228 = vmatprep.subr.bf16.mxu0 %v9138
  %9229 = vmatpush1.bf16.msra.mxu0 %v9135
  %9230 = vmatprep.subr.bf16.mxu0 0
  %9231 = vmatpush1.bf16.msra.mxu0 0
  %9232 = vmatprep.subr.bf16.mxu0 0
  %9233 = vmatpush1.bf16.msra.mxu0 0
  %9234 = vmatprep.subr.bf16.mxu0 0
  %9235 = vmatpush1.bf16.msra.mxu0 0
  %9236 = vmatprep.subr.bf16.mxu0 0
  %9237 = vmatpush1.bf16.msra.mxu0 0
  %9238 = vmatprep.subr.bf16.mxu0 0
  %9239 = vmatpush1.bf16.msra.mxu0 0
  %9240 = vmatprep.subr.bf16.mxu0 0
  %9241 = vmatpush1.bf16.msra.mxu0 0
  %9242 = vmatprep.subr.bf16.mxu0 0
  %9243 = vmatpush1.bf16.msra.mxu0 0
  %9244 = vmatprep.subr.bf16.mxu0 0
  %9245 = vmatpush1.bf16.msra.mxu0 0
  %9246 = vmatprep.subr.bf16.mxu0 0
  %9247 = vmatpush1.bf16.msra.mxu0 0
  %9248 = vmatprep.subr.bf16.mxu0 0
  %9249 = vmatpush1.bf16.msra.mxu0 0
  %9250 = vmatprep.subr.bf16.mxu0 0
  %9251 = vmatpush1.bf16.msra.mxu0 0
  %9252 = vmatprep.subr.bf16.mxu0 0
  %9253 = vmatpush1.bf16.msra.mxu0 0
  %9254 = vmatprep.subr.bf16.mxu0 0
  %9255 = vmatpush1.bf16.msra.mxu0 0
  %9256 = vmatprep.subr.bf16.mxu0 0
  %9257 = vmatpush1.bf16.msra.mxu0 0
  %9258 = vmatprep.subr.bf16.mxu0 0
  %9259 = vmatpush1.bf16.msra.mxu0 0
  %9260 = vmatprep.mubr.bf16.mxu0 0
  %9261 = vmatmul.mubr.bf16.gmra.mrb[0].mxu0 %v9120
  %v9262 = vpop.f32.mrb[0].mxu0
  %v9263 = vadd.f32 0.0, %v9262
  %v9264 = vpop.f32.mrb[0].mxu0
  %v9265 = vadd.f32 0.0, %v9264
  %v9266 = vpop.f32.mrb[0].mxu0
  %v9267 = vpop.f32.mrb[0].mxu0
  %9268 = vdwg.mxu0
  %9269 = vmatprep.subr.bf16.mxu0 %v9144
  %9270 = vmatpush1.bf16.msra.mxu0 %v9141
  %9271 = vmatprep.subr.bf16.mxu0 0
  %9272 = vmatpush1.bf16.msra.mxu0 0
  %9273 = vmatprep.subr.bf16.mxu0 0
  %9274 = vmatpush1.bf16.msra.mxu0 0
  %9275 = vmatprep.subr.bf16.mxu0 0
  %9276 = vmatpush1.bf16.msra.mxu0 0
  %9277 = vmatprep.subr.bf16.mxu0 0
  %9278 = vmatpush1.bf16.msra.mxu0 0
  %9279 = vmatprep.subr.bf16.mxu0 0
  %9280 = vmatpush1.bf16.msra.mxu0 0
  %9281 = vmatprep.subr.bf16.mxu0 0
  %9282 = vmatpush1.bf16.msra.mxu0 0
  %9283 = vmatprep.subr.bf16.mxu0 0
  %9284 = vmatpush1.bf16.msra.mxu0 0
  %9285 = vmatprep.subr.bf16.mxu0 0
  %9286 = vmatpush1.bf16.msra.mxu0 0
  %9287 = vmatprep.subr.bf16.mxu0 0
  %9288 = vmatpush1.bf16.msra.mxu0 0
  %9289 = vmatprep.subr.bf16.mxu0 0
  %9290 = vmatpush1.bf16.msra.mxu0 0
  %9291 = vmatprep.subr.bf16.mxu0 0
  %9292 = vmatpush1.bf16.msra.mxu0 0
  %9293 = vmatprep.subr.bf16.mxu0 0
  %9294 = vmatpush1.bf16.msra.mxu0 0
  %9295 = vmatprep.subr.bf16.mxu0 0
  %9296 = vmatpush1.bf16.msra.mxu0 0
  %9297 = vmatprep.subr.bf16.mxu0 0
  %9298 = vmatpush1.bf16.msra.mxu0 0
  %9299 = vmatprep.subr.bf16.mxu0 0
  %9300 = vmatpush1.bf16.msra.mxu0 0
  %9301 = vmatprep.mubr.bf16.mxu0 0
  %9302 = vmatmul.mubr.bf16.gmra.mrb[0].mxu0 %v9120
  %v9303 = vpop.f32.mrb[0].mxu0
  %v9304 = vadd.f32 0.0, %v9303
  %v9305 = vpop.f32.mrb[0].mxu0
  %v9306 = vadd.f32 0.0, %v9305
  %v9307 = vpop.f32.mrb[0].mxu0
  %v9308 = vpop.f32.mrb[0].mxu0
  %9309 = vdwg.mxu0
  %v9310 = vadd.f32 %v9085, %v9181
  %v9311 = vadd.f32 %v9086, %v9183
  %v9312 = vadd.f32 %v9087, %v9222
  %v9313 = vadd.f32 %v9088, %v9224
  %v9314 = vadd.f32 %v9089, %v9263
  %v9315 = vadd.f32 %v9090, %v9265
  %v9316 = vadd.f32 %v9091, %v9304
  %v9317 = vadd.f32 %v9092, %v9306
  %v9318 = vld [vmem:[#allocation3 + $0x4] sm:$0xff]
  %v9319 = vld [vmem:[#allocation3 + $0xc] sm:$0xff]
  %v9320 = vld [vmem:[#allocation3 + $0x14] sm:$0xff]
  %v9321 = vld [vmem:[#allocation3 + $0x1c] sm:$0xff]
  %v9326 = vunpack.c.l.b16 %v9318
  %v9327 = vunpack.c.h.b16 %v9318
  %v9328 = vunpack.c.l.b16 %v9319
  %v9329 = vunpack.c.h.b16 %v9319
  %v9330 = vunpack.c.l.b16 %v9320
  %v9331 = vunpack.c.h.b16 %v9320
  %v9332 = vunpack.c.l.b16 %v9321
  %v9333 = vunpack.c.h.b16 %v9321
  %v9334 = vpack.c.b16 %v9326, %v9326
  %v9335 = vpack.c.b16 %v9327, %v9327
  %v9336 = vpack.c.b16 %v9328, %v9328
  %v9337 = vpack.c.b16 %v9329, %v9329
  %v9338 = vpack.c.b16 %v9330, %v9330
  %v9339 = vpack.c.b16 %v9331, %v9331
  %v9340 = vpack.c.b16 %v9332, %v9332
  %v9341 = vpack.c.b16 %v9333, %v9333
  %v9343 = vsel %vm161, %v6367, 0
  %v9346 = vsel %vm165, %v9334, 0
  %v9349 = vsel %vm165, %v9335, 0
  %v9352 = vsel %vm165, %v9336, 0
  %v9355 = vsel %vm165, %v9337, 0
  %v9358 = vsel %vm165, %v9338, 0
  %v9361 = vsel %vm165, %v9339, 0
  %v9364 = vsel %vm165, %v9340, 0
  %v9367 = vsel %vm165, %v9341, 0
  %9369 = vmatprep.subr.bf16.mxu0 %v9349
  %9370 = vmatpush1.bf16.msra.mxu0 %v9346
  %9371 = vmatprep.subr.bf16.mxu0 0
  %9372 = vmatpush1.bf16.msra.mxu0 0
  %9373 = vmatprep.subr.bf16.mxu0 0
  %9374 = vmatpush1.bf16.msra.mxu0 0
  %9375 = vmatprep.subr.bf16.mxu0 0
  %9376 = vmatpush1.bf16.msra.mxu0 0
  %9377 = vmatprep.subr.bf16.mxu0 0
  %9378 = vmatpush1.bf16.msra.mxu0 0
  %9379 = vmatprep.subr.bf16.mxu0 0
  %9380 = vmatpush1.bf16.msra.mxu0 0
  %9381 = vmatprep.subr.bf16.mxu0 0
  %9382 = vmatpush1.bf16.msra.mxu0 0
  %9383 = vmatprep.subr.bf16.mxu0 0
  %9384 = vmatpush1.bf16.msra.mxu0 0
  %9385 = vmatprep.subr.bf16.mxu0 0
  %9386 = vmatpush1.bf16.msra.mxu0 0
  %9387 = vmatprep.subr.bf16.mxu0 0
  %9388 = vmatpush1.bf16.msra.mxu0 0
  %9389 = vmatprep.subr.bf16.mxu0 0
  %9390 = vmatpush1.bf16.msra.mxu0 0
  %9391 = vmatprep.subr.bf16.mxu0 0
  %9392 = vmatpush1.bf16.msra.mxu0 0
  %9393 = vmatprep.subr.bf16.mxu0 0
  %9394 = vmatpush1.bf16.msra.mxu0 0
  %9395 = vmatprep.subr.bf16.mxu0 0
  %9396 = vmatpush1.bf16.msra.mxu0 0
  %9397 = vmatprep.subr.bf16.mxu0 0
  %9398 = vmatpush1.bf16.msra.mxu0 0
  %9399 = vmatprep.subr.bf16.mxu0 0
  %9400 = vmatpush1.bf16.msra.mxu0 0
  %9401 = vmatprep.mubr.bf16.mxu0 0
  %9402 = vmatmul.mubr.bf16.gmra.mrb[0].mxu0 %v9343
  %v9403 = vpop.f32.mrb[0].mxu0
  %v9404 = vadd.f32 0.0, %v9403
  %v9405 = vpop.f32.mrb[0].mxu0
  %v9406 = vadd.f32 0.0, %v9405
  %v9407 = vpop.f32.mrb[0].mxu0
  %v9408 = vpop.f32.mrb[0].mxu0
  %9409 = vdwg.mxu0
  %9410 = vmatprep.subr.bf16.mxu0 %v9355
  %9411 = vmatpush1.bf16.msra.mxu0 %v9352
  %9412 = vmatprep.subr.bf16.mxu0 0
  %9413 = vmatpush1.bf16.msra.mxu0 0
  %9414 = vmatprep.subr.bf16.mxu0 0
  %9415 = vmatpush1.bf16.msra.mxu0 0
  %9416 = vmatprep.subr.bf16.mxu0 0
  %9417 = vmatpush1.bf16.msra.mxu0 0
  %9418 = vmatprep.subr.bf16.mxu0 0
  %9419 = vmatpush1.bf16.msra.mxu0 0
  %9420 = vmatprep.subr.bf16.mxu0 0
  %9421 = vmatpush1.bf16.msra.mxu0 0
  %9422 = vmatprep.subr.bf16.mxu0 0
  %9423 = vmatpush1.bf16.msra.mxu0 0
  %9424 = vmatprep.subr.bf16.mxu0 0
  %9425 = vmatpush1.bf16.msra.mxu0 0
  %9426 = vmatprep.subr.bf16.mxu0 0
  %9427 = vmatpush1.bf16.msra.mxu0 0
  %9428 = vmatprep.subr.bf16.mxu0 0
  %9429 = vmatpush1.bf16.msra.mxu0 0
  %9430 = vmatprep.subr.bf16.mxu0 0
  %9431 = vmatpush1.bf16.msra.mxu0 0
  %9432 = vmatprep.subr.bf16.mxu0 0
  %9433 = vmatpush1.bf16.msra.mxu0 0
  %9434 = vmatprep.subr.bf16.mxu0 0
  %9435 = vmatpush1.bf16.msra.mxu0 0
  %9436 = vmatprep.subr.bf16.mxu0 0
  %9437 = vmatpush1.bf16.msra.mxu0 0
  %9438 = vmatprep.subr.bf16.mxu0 0
  %9439 = vmatpush1.bf16.msra.mxu0 0
  %9440 = vmatprep.subr.bf16.mxu0 0
  %9441 = vmatpush1.bf16.msra.mxu0 0
  %9442 = vmatprep.mubr.bf16.mxu0 0
  %9443 = vmatmul.mubr.bf16.gmra.mrb[0].mxu0 %v9343
  %v9444 = vpop.f32.mrb[0].mxu0
  %v9445 = vadd.f32 0.0, %v9444
  %v9446 = vpop.f32.mrb[0].mxu0
  %v9447 = vadd.f32 0.0, %v9446
  %v9448 = vpop.f32.mrb[0].mxu0
  %v9449 = vpop.f32.mrb[0].mxu0
  %9450 = vdwg.mxu0
  %9451 = vmatprep.subr.bf16.mxu0 %v9361
  %9452 = vmatpush1.bf16.msra.mxu0 %v9358
  %9453 = vmatprep.subr.bf16.mxu0 0
  %9454 = vmatpush1.bf16.msra.mxu0 0
  %9455 = vmatprep.subr.bf16.mxu0 0
  %9456 = vmatpush1.bf16.msra.mxu0 0
  %9457 = vmatprep.subr.bf16.mxu0 0
  %9458 = vmatpush1.bf16.msra.mxu0 0
  %9459 = vmatprep.subr.bf16.mxu0 0
  %9460 = vmatpush1.bf16.msra.mxu0 0
  %9461 = vmatprep.subr.bf16.mxu0 0
  %9462 = vmatpush1.bf16.msra.mxu0 0
  %9463 = vmatprep.subr.bf16.mxu0 0
  %9464 = vmatpush1.bf16.msra.mxu0 0
  %9465 = vmatprep.subr.bf16.mxu0 0
  %9466 = vmatpush1.bf16.msra.mxu0 0
  %9467 = vmatprep.subr.bf16.mxu0 0
  %9468 = vmatpush1.bf16.msra.mxu0 0
  %9469 = vmatprep.subr.bf16.mxu0 0
  %9470 = vmatpush1.bf16.msra.mxu0 0
  %9471 = vmatprep.subr.bf16.mxu0 0
  %9472 = vmatpush1.bf16.msra.mxu0 0
  %9473 = vmatprep.subr.bf16.mxu0 0
  %9474 = vmatpush1.bf16.msra.mxu0 0
  %9475 = vmatprep.subr.bf16.mxu0 0
  %9476 = vmatpush1.bf16.msra.mxu0 0
  %9477 = vmatprep.subr.bf16.mxu0 0
  %9478 = vmatpush1.bf16.msra.mxu0 0
  %9479 = vmatprep.subr.bf16.mxu0 0
  %9480 = vmatpush1.bf16.msra.mxu0 0
  %9481 = vmatprep.subr.bf16.mxu0 0
  %9482 = vmatpush1.bf16.msra.mxu0 0
  %9483 = vmatprep.mubr.bf16.mxu0 0
  %9484 = vmatmul.mubr.bf16.gmra.mrb[0].mxu0 %v9343
  %v9485 = vpop.f32.mrb[0].mxu0
  %v9486 = vadd.f32 0.0, %v9485
  %v9487 = vpop.f32.mrb[0].mxu0
  %v9488 = vadd.f32 0.0, %v9487
  %v9489 = vpop.f32.mrb[0].mxu0
  %v9490 = vpop.f32.mrb[0].mxu0
  %9491 = vdwg.mxu0
  %9492 = vmatprep.subr.bf16.mxu0 %v9367
  %9493 = vmatpush1.bf16.msra.mxu0 %v9364
  %9494 = vmatprep.subr.bf16.mxu0 0
  %9495 = vmatpush1.bf16.msra.mxu0 0
  %9496 = vmatprep.subr.bf16.mxu0 0
  %9497 = vmatpush1.bf16.msra.mxu0 0
  %9498 = vmatprep.subr.bf16.mxu0 0
  %9499 = vmatpush1.bf16.msra.mxu0 0
  %9500 = vmatprep.subr.bf16.mxu0 0
  %9501 = vmatpush1.bf16.msra.mxu0 0
  %9502 = vmatprep.subr.bf16.mxu0 0
  %9503 = vmatpush1.bf16.msra.mxu0 0
  %9504 = vmatprep.subr.bf16.mxu0 0
  %9505 = vmatpush1.bf16.msra.mxu0 0
  %9506 = vmatprep.subr.bf16.mxu0 0
  %9507 = vmatpush1.bf16.msra.mxu0 0
  %9508 = vmatprep.subr.bf16.mxu0 0
  %9509 = vmatpush1.bf16.msra.mxu0 0
  %9510 = vmatprep.subr.bf16.mxu0 0
  %9511 = vmatpush1.bf16.msra.mxu0 0
  %9512 = vmatprep.subr.bf16.mxu0 0
  %9513 = vmatpush1.bf16.msra.mxu0 0
  %9514 = vmatprep.subr.bf16.mxu0 0
  %9515 = vmatpush1.bf16.msra.mxu0 0
  %9516 = vmatprep.subr.bf16.mxu0 0
  %9517 = vmatpush1.bf16.msra.mxu0 0
  %9518 = vmatprep.subr.bf16.mxu0 0
  %9519 = vmatpush1.bf16.msra.mxu0 0
  %9520 = vmatprep.subr.bf16.mxu0 0
  %9521 = vmatpush1.bf16.msra.mxu0 0
  %9522 = vmatprep.subr.bf16.mxu0 0
  %9523 = vmatpush1.bf16.msra.mxu0 0
  %9524 = vmatprep.mubr.bf16.mxu0 0
  %9525 = vmatmul.mubr.bf16.gmra.mrb[0].mxu0 %v9343
  %v9526 = vpop.f32.mrb[0].mxu0
  %v9527 = vadd.f32 0.0, %v9526
  %v9528 = vpop.f32.mrb[0].mxu0
  %v9529 = vadd.f32 0.0, %v9528
  %v9530 = vpop.f32.mrb[0].mxu0
  %v9531 = vpop.f32.mrb[0].mxu0
  %9532 = vdwg.mxu0
  %v9533 = vadd.f32 %v9310, %v9404
  %v9534 = vadd.f32 %v9311, %v9406
  %v9535 = vadd.f32 %v9312, %v9445
  %v9536 = vadd.f32 %v9313, %v9447
  %v9537 = vadd.f32 %v9314, %v9486
  %v9538 = vadd.f32 %v9315, %v9488
  %v9539 = vadd.f32 %v9316, %v9527
  %v9540 = vadd.f32 %v9317, %v9529
  %v9541 = vld [vmem:[#allocation3 + $0x4] sm:$0xff]
  %v9542 = vld [vmem:[#allocation3 + $0xc] sm:$0xff]
  %v9543 = vld [vmem:[#allocation3 + $0x14] sm:$0xff]
  %v9544 = vld [vmem:[#allocation3 + $0x1c] sm:$0xff]
  %v9545 = vld [vmem:[#allocation3 + $0x24] sm:$0xf]
  %v9551 = vunpack.c.l.b16 %v9541
  %v9552 = vunpack.c.h.b16 %v9541
  %v9553 = vunpack.c.l.b16 %v9542
  %v9554 = vunpack.c.h.b16 %v9542
  %v9555 = vunpack.c.l.b16 %v9543
  %v9556 = vunpack.c.h.b16 %v9543
  %v9557 = vunpack.c.l.b16 %v9544
  %v9558 = vunpack.c.h.b16 %v9544
  %v9559 = vunpack.c.l.b16 %v9545
  %v9560 = vpack.c.b16 %v9551, %v9551
  %v9561 = vpack.c.b16 %v9552, %v9552
  %v9562 = vpack.c.b16 %v9553, %v9553
  %v9563 = vpack.c.b16 %v9554, %v9554
  %v9564 = vpack.c.b16 %v9555, %v9555
  %v9565 = vpack.c.b16 %v9556, %v9556
  %v9566 = vpack.c.b16 %v9557, %v9557
  %v9567 = vpack.c.b16 %v9558, %v9558
  %v9568 = vpack.c.b16 %v9559, %v9559
  %9569 = vrot.lane.b32.xlu0 %v9560, 127
  %v9570 = vpop.permute.xlu0 %9569
  %9571 = vrot.lane.b32.xlu0 %v9561, 127
  %v9572 = vpop.permute.xlu0 %9571
  %9573 = vrot.lane.b32.xlu0 %v9562, 127
  %v9574 = vpop.permute.xlu0 %9573
  %9575 = vrot.lane.b32.xlu0 %v9563, 127
  %v9576 = vpop.permute.xlu0 %9575
  %9577 = vrot.lane.b32.xlu0 %v9564, 127
  %v9578 = vpop.permute.xlu0 %9577
  %9579 = vrot.lane.b32.xlu0 %v9565, 127
  %v9580 = vpop.permute.xlu0 %9579
  %9581 = vrot.lane.b32.xlu0 %v9566, 127
  %v9582 = vpop.permute.xlu0 %9581
  %9583 = vrot.lane.b32.xlu0 %v9567, 127
  %v9584 = vpop.permute.xlu0 %9583
  %9585 = vrot.lane.b32.xlu0 %v9568, 127
  %v9586 = vpop.permute.xlu0 %9585
  %v9587 = vsel %vm3327, %v9570, %v9572
  %v9588 = vsel %vm3327, %v9572, %v9574
  %v9589 = vsel %vm3327, %v9574, %v9576
  %v9590 = vsel %vm3327, %v9576, %v9578
  %v9591 = vsel %vm3327, %v9578, %v9580
  %v9592 = vsel %vm3327, %v9580, %v9582
  %v9593 = vsel %vm3327, %v9582, %v9584
  %v9594 = vsel %vm3327, %v9584, %v9586
  %v9596 = vsel %vm161, %v6368, 0
  %v9599 = vsel %vm165, %v9587, 0
  %v9602 = vsel %vm165, %v9588, 0
  %v9605 = vsel %vm165, %v9589, 0
  %v9608 = vsel %vm165, %v9590, 0
  %v9611 = vsel %vm165, %v9591, 0
  %v9614 = vsel %vm165, %v9592, 0
  %v9617 = vsel %vm165, %v9593, 0
  %v9620 = vsel %vm165, %v9594, 0
  %9622 = vmatprep.subr.bf16.mxu0 %v9602
  %9623 = vmatpush1.bf16.msra.mxu0 %v9599
  %9624 = vmatprep.subr.bf16.mxu0 0
  %9625 = vmatpush1.bf16.msra.mxu0 0
  %9626 = vmatprep.subr.bf16.mxu0 0
  %9627 = vmatpush1.bf16.msra.mxu0 0
  %9628 = vmatprep.subr.bf16.mxu0 0
  %9629 = vmatpush1.bf16.msra.mxu0 0
  %9630 = vmatprep.subr.bf16.mxu0 0
  %9631 = vmatpush1.bf16.msra.mxu0 0
  %9632 = vmatprep.subr.bf16.mxu0 0
  %9633 = vmatpush1.bf16.msra.mxu0 0
  %9634 = vmatprep.subr.bf16.mxu0 0
  %9635 = vmatpush1.bf16.msra.mxu0 0
  %9636 = vmatprep.subr.bf16.mxu0 0
  %9637 = vmatpush1.bf16.msra.mxu0 0
  %9638 = vmatprep.subr.bf16.mxu0 0
  %9639 = vmatpush1.bf16.msra.mxu0 0
  %9640 = vmatprep.subr.bf16.mxu0 0
  %9641 = vmatpush1.bf16.msra.mxu0 0
  %9642 = vmatprep.subr.bf16.mxu0 0
  %9643 = vmatpush1.bf16.msra.mxu0 0
  %9644 = vmatprep.subr.bf16.mxu0 0
  %9645 = vmatpush1.bf16.msra.mxu0 0
  %9646 = vmatprep.subr.bf16.mxu0 0
  %9647 = vmatpush1.bf16.msra.mxu0 0
  %9648 = vmatprep.subr.bf16.mxu0 0
  %9649 = vmatpush1.bf16.msra.mxu0 0
  %9650 = vmatprep.subr.bf16.mxu0 0
  %9651 = vmatpush1.bf16.msra.mxu0 0
  %9652 = vmatprep.subr.bf16.mxu0 0
  %9653 = vmatpush1.bf16.msra.mxu0 0
  %9654 = vmatprep.mubr.bf16.mxu0 0
  %9655 = vmatmul.mubr.bf16.gmra.mrb[0].mxu0 %v9596
  %v9656 = vpop.f32.mrb[0].mxu0
  %v9657 = vadd.f32 0.0, %v9656
  %v9658 = vpop.f32.mrb[0].mxu0
  %v9659 = vadd.f32 0.0, %v9658
  %v9660 = vpop.f32.mrb[0].mxu0
  %v9661 = vpop.f32.mrb[0].mxu0
  %9662 = vdwg.mxu0
  %9663 = vmatprep.subr.bf16.mxu0 %v9608
  %9664 = vmatpush1.bf16.msra.mxu0 %v9605
  %9665 = vmatprep.subr.bf16.mxu0 0
  %9666 = vmatpush1.bf16.msra.mxu0 0
  %9667 = vmatprep.subr.bf16.mxu0 0
  %9668 = vmatpush1.bf16.msra.mxu0 0
  %9669 = vmatprep.subr.bf16.mxu0 0
  %9670 = vmatpush1.bf16.msra.mxu0 0
  %9671 = vmatprep.subr.bf16.mxu0 0
  %9672 = vmatpush1.bf16.msra.mxu0 0
  %9673 = vmatprep.subr.bf16.mxu0 0
  %9674 = vmatpush1.bf16.msra.mxu0 0
  %9675 = vmatprep.subr.bf16.mxu0 0
  %9676 = vmatpush1.bf16.msra.mxu0 0
  %9677 = vmatprep.subr.bf16.mxu0 0
  %9678 = vmatpush1.bf16.msra.mxu0 0
  %9679 = vmatprep.subr.bf16.mxu0 0
  %9680 = vmatpush1.bf16.msra.mxu0 0
  %9681 = vmatprep.subr.bf16.mxu0 0
  %9682 = vmatpush1.bf16.msra.mxu0 0
  %9683 = vmatprep.subr.bf16.mxu0 0
  %9684 = vmatpush1.bf16.msra.mxu0 0
  %9685 = vmatprep.subr.bf16.mxu0 0
  %9686 = vmatpush1.bf16.msra.mxu0 0
  %9687 = vmatprep.subr.bf16.mxu0 0
  %9688 = vmatpush1.bf16.msra.mxu0 0
  %9689 = vmatprep.subr.bf16.mxu0 0
  %9690 = vmatpush1.bf16.msra.mxu0 0
  %9691 = vmatprep.subr.bf16.mxu0 0
  %9692 = vmatpush1.bf16.msra.mxu0 0
  %9693 = vmatprep.subr.bf16.mxu0 0
  %9694 = vmatpush1.bf16.msra.mxu0 0
  %9695 = vmatprep.mubr.bf16.mxu0 0
  %9696 = vmatmul.mubr.bf16.gmra.mrb[0].mxu0 %v9596
  %v9697 = vpop.f32.mrb[0].mxu0
  %v9698 = vadd.f32 0.0, %v9697
  %v9699 = vpop.f32.mrb[0].mxu0
  %v9700 = vadd.f32 0.0, %v9699
  %v9701 = vpop.f32.mrb[0].mxu0
  %v9702 = vpop.f32.mrb[0].mxu0
  %9703 = vdwg.mxu0
  %9704 = vmatprep.subr.bf16.mxu0 %v9614
  %9705 = vmatpush1.bf16.msra.mxu0 %v9611
  %9706 = vmatprep.subr.bf16.mxu0 0
  %9707 = vmatpush1.bf16.msra.mxu0 0
  %9708 = vmatprep.subr.bf16.mxu0 0
  %9709 = vmatpush1.bf16.msra.mxu0 0
  %9710 = vmatprep.subr.bf16.mxu0 0
  %9711 = vmatpush1.bf16.msra.mxu0 0
  %9712 = vmatprep.subr.bf16.mxu0 0
  %9713 = vmatpush1.bf16.msra.mxu0 0
  %9714 = vmatprep.subr.bf16.mxu0 0
  %9715 = vmatpush1.bf16.msra.mxu0 0
  %9716 = vmatprep.subr.bf16.mxu0 0
  %9717 = vmatpush1.bf16.msra.mxu0 0
  %9718 = vmatprep.subr.bf16.mxu0 0
  %9719 = vmatpush1.bf16.msra.mxu0 0
  %9720 = vmatprep.subr.bf16.mxu0 0
  %9721 = vmatpush1.bf16.msra.mxu0 0
  %9722 = vmatprep.subr.bf16.mxu0 0
  %9723 = vmatpush1.bf16.msra.mxu0 0
  %9724 = vmatprep.subr.bf16.mxu0 0
  %9725 = vmatpush1.bf16.msra.mxu0 0
  %9726 = vmatprep.subr.bf16.mxu0 0
  %9727 = vmatpush1.bf16.msra.mxu0 0
  %9728 = vmatprep.subr.bf16.mxu0 0
  %9729 = vmatpush1.bf16.msra.mxu0 0
  %9730 = vmatprep.subr.bf16.mxu0 0
  %9731 = vmatpush1.bf16.msra.mxu0 0
  %9732 = vmatprep.subr.bf16.mxu0 0
  %9733 = vmatpush1.bf16.msra.mxu0 0
  %9734 = vmatprep.subr.bf16.mxu0 0
  %9735 = vmatpush1.bf16.msra.mxu0 0
  %9736 = vmatprep.mubr.bf16.mxu0 0
  %9737 = vmatmul.mubr.bf16.gmra.mrb[0].mxu0 %v9596
  %v9738 = vpop.f32.mrb[0].mxu0
  %v9739 = vadd.f32 0.0, %v9738
  %v9740 = vpop.f32.mrb[0].mxu0
  %v9741 = vadd.f32 0.0, %v9740
  %v9742 = vpop.f32.mrb[0].mxu0
  %v9743 = vpop.f32.mrb[0].mxu0
  %9744 = vdwg.mxu0
  %9745 = vmatprep.subr.bf16.mxu0 %v9620
  %9746 = vmatpush1.bf16.msra.mxu0 %v9617
  %9747 = vmatprep.subr.bf16.mxu0 0
  %9748 = vmatpush1.bf16.msra.mxu0 0
  %9749 = vmatprep.subr.bf16.mxu0 0
  %9750 = vmatpush1.bf16.msra.mxu0 0
  %9751 = vmatprep.subr.bf16.mxu0 0
  %9752 = vmatpush1.bf16.msra.mxu0 0
  %9753 = vmatprep.subr.bf16.mxu0 0
  %9754 = vmatpush1.bf16.msra.mxu0 0
  %9755 = vmatprep.subr.bf16.mxu0 0
  %9756 = vmatpush1.bf16.msra.mxu0 0
  %9757 = vmatprep.subr.bf16.mxu0 0
  %9758 = vmatpush1.bf16.msra.mxu0 0
  %9759 = vmatprep.subr.bf16.mxu0 0
  %9760 = vmatpush1.bf16.msra.mxu0 0
  %9761 = vmatprep.subr.bf16.mxu0 0
  %9762 = vmatpush1.bf16.msra.mxu0 0
  %9763 = vmatprep.subr.bf16.mxu0 0
  %9764 = vmatpush1.bf16.msra.mxu0 0
  %9765 = vmatprep.subr.bf16.mxu0 0
  %9766 = vmatpush1.bf16.msra.mxu0 0
  %9767 = vmatprep.subr.bf16.mxu0 0
  %9768 = vmatpush1.bf16.msra.mxu0 0
  %9769 = vmatprep.subr.bf16.mxu0 0
  %9770 = vmatpush1.bf16.msra.mxu0 0
  %9771 = vmatprep.subr.bf16.mxu0 0
  %9772 = vmatpush1.bf16.msra.mxu0 0
  %9773 = vmatprep.subr.bf16.mxu0 0
  %9774 = vmatpush1.bf16.msra.mxu0 0
  %9775 = vmatprep.subr.bf16.mxu0 0
  %9776 = vmatpush1.bf16.msra.mxu0 0
  %9777 = vmatprep.mubr.bf16.mxu0 0
  %9778 = vmatmul.mubr.bf16.gmra.mrb[0].mxu0 %v9596
  %v9779 = vpop.f32.mrb[0].mxu0
  %v9780 = vadd.f32 0.0, %v9779
  %v9781 = vpop.f32.mrb[0].mxu0
  %v9782 = vadd.f32 0.0, %v9781
  %v9783 = vpop.f32.mrb[0].mxu0
  %v9784 = vpop.f32.mrb[0].mxu0
  %9785 = vdwg.mxu0
  %v9786 = vadd.f32 %v9533, %v9657
  %v9787 = vadd.f32 %v9534, %v9659
  %v9788 = vadd.f32 %v9535, %v9698
  %v9789 = vadd.f32 %v9536, %v9700
  %v9790 = vadd.f32 %v9537, %v9739
  %v9791 = vadd.f32 %v9538, %v9741
  %v9792 = vadd.f32 %v9539, %v9780
  %v9793 = vadd.f32 %v9540, %v9782
  %9794 = vrot.lane.b32.xlu0 %v9560, 119
  %v9795 = vpop.permute.xlu0 %9794
  %9796 = vrot.lane.b32.xlu0 %v9561, 119
  %v9797 = vpop.permute.xlu0 %9796
  %9798 = vrot.lane.b32.xlu0 %v9562, 119
  %v9799 = vpop.permute.xlu0 %9798
  %9800 = vrot.lane.b32.xlu0 %v9563, 119
  %v9801 = vpop.permute.xlu0 %9800
  %9802 = vrot.lane.b32.xlu0 %v9564, 119
  %v9803 = vpop.permute.xlu0 %9802
  %9804 = vrot.lane.b32.xlu0 %v9565, 119
  %v9805 = vpop.permute.xlu0 %9804
  %9806 = vrot.lane.b32.xlu0 %v9566, 119
  %v9807 = vpop.permute.xlu0 %9806
  %9808 = vrot.lane.b32.xlu0 %v9567, 119
  %v9809 = vpop.permute.xlu0 %9808
  %9810 = vrot.lane.b32.xlu0 %v9568, 119
  %v9811 = vpop.permute.xlu0 %9810
  %v9812 = vsel %vm3553, %v9795, %v9797
  %v9813 = vsel %vm3553, %v9797, %v9799
  %v9814 = vsel %vm3553, %v9799, %v9801
  %v9815 = vsel %vm3553, %v9801, %v9803
  %v9816 = vsel %vm3553, %v9803, %v9805
  %v9817 = vsel %vm3553, %v9805, %v9807
  %v9818 = vsel %vm3553, %v9807, %v9809
  %v9819 = vsel %vm3553, %v9809, %v9811
  %v9821 = vsel %vm161, %v6369, 0
  %v9824 = vsel %vm165, %v9812, 0
  %v9827 = vsel %vm165, %v9813, 0
  %v9830 = vsel %vm165, %v9814, 0
  %v9833 = vsel %vm165, %v9815, 0
  %v9836 = vsel %vm165, %v9816, 0
  %v9839 = vsel %vm165, %v9817, 0
  %v9842 = vsel %vm165, %v9818, 0
  %v9845 = vsel %vm165, %v9819, 0
  %9847 = vmatprep.subr.bf16.mxu0 %v9827
  %9848 = vmatpush1.bf16.msra.mxu0 %v9824
  %9849 = vmatprep.subr.bf16.mxu0 0
  %9850 = vmatpush1.bf16.msra.mxu0 0
  %9851 = vmatprep.subr.bf16.mxu0 0
  %9852 = vmatpush1.bf16.msra.mxu0 0
  %9853 = vmatprep.subr.bf16.mxu0 0
  %9854 = vmatpush1.bf16.msra.mxu0 0
  %9855 = vmatprep.subr.bf16.mxu0 0
  %9856 = vmatpush1.bf16.msra.mxu0 0
  %9857 = vmatprep.subr.bf16.mxu0 0
  %9858 = vmatpush1.bf16.msra.mxu0 0
  %9859 = vmatprep.subr.bf16.mxu0 0
  %9860 = vmatpush1.bf16.msra.mxu0 0
  %9861 = vmatprep.subr.bf16.mxu0 0
  %9862 = vmatpush1.bf16.msra.mxu0 0
  %9863 = vmatprep.subr.bf16.mxu0 0
  %9864 = vmatpush1.bf16.msra.mxu0 0
  %9865 = vmatprep.subr.bf16.mxu0 0
  %9866 = vmatpush1.bf16.msra.mxu0 0
  %9867 = vmatprep.subr.bf16.mxu0 0
  %9868 = vmatpush1.bf16.msra.mxu0 0
  %9869 = vmatprep.subr.bf16.mxu0 0
  %9870 = vmatpush1.bf16.msra.mxu0 0
  %9871 = vmatprep.subr.bf16.mxu0 0
  %9872 = vmatpush1.bf16.msra.mxu0 0
  %9873 = vmatprep.subr.bf16.mxu0 0
  %9874 = vmatpush1.bf16.msra.mxu0 0
  %9875 = vmatprep.subr.bf16.mxu0 0
  %9876 = vmatpush1.bf16.msra.mxu0 0
  %9877 = vmatprep.subr.bf16.mxu0 0
  %9878 = vmatpush1.bf16.msra.mxu0 0
  %9879 = vmatprep.mubr.bf16.mxu0 0
  %9880 = vmatmul.mubr.bf16.gmra.mrb[0].mxu0 %v9821
  %v9881 = vpop.f32.mrb[0].mxu0
  %v9882 = vadd.f32 0.0, %v9881
  %v9883 = vpop.f32.mrb[0].mxu0
  %v9884 = vadd.f32 0.0, %v9883
  %v9885 = vpop.f32.mrb[0].mxu0
  %v9886 = vpop.f32.mrb[0].mxu0
  %9887 = vdwg.mxu0
  %9888 = vmatprep.subr.bf16.mxu0 %v9833
  %9889 = vmatpush1.bf16.msra.mxu0 %v9830
  %9890 = vmatprep.subr.bf16.mxu0 0
  %9891 = vmatpush1.bf16.msra.mxu0 0
  %9892 = vmatprep.subr.bf16.mxu0 0
  %9893 = vmatpush1.bf16.msra.mxu0 0
  %9894 = vmatprep.subr.bf16.mxu0 0
  %9895 = vmatpush1.bf16.msra.mxu0 0
  %9896 = vmatprep.subr.bf16.mxu0 0
  %9897 = vmatpush1.bf16.msra.mxu0 0
  %9898 = vmatprep.subr.bf16.mxu0 0
  %9899 = vmatpush1.bf16.msra.mxu0 0
  %9900 = vmatprep.subr.bf16.mxu0 0
  %9901 = vmatpush1.bf16.msra.mxu0 0
  %9902 = vmatprep.subr.bf16.mxu0 0
  %9903 = vmatpush1.bf16.msra.mxu0 0
  %9904 = vmatprep.subr.bf16.mxu0 0
  %9905 = vmatpush1.bf16.msra.mxu0 0
  %9906 = vmatprep.subr.bf16.mxu0 0
  %9907 = vmatpush1.bf16.msra.mxu0 0
  %9908 = vmatprep.subr.bf16.mxu0 0
  %9909 = vmatpush1.bf16.msra.mxu0 0
  %9910 = vmatprep.subr.bf16.mxu0 0
  %9911 = vmatpush1.bf16.msra.mxu0 0
  %9912 = vmatprep.subr.bf16.mxu0 0
  %9913 = vmatpush1.bf16.msra.mxu0 0
  %9914 = vmatprep.subr.bf16.mxu0 0
  %9915 = vmatpush1.bf16.msra.mxu0 0
  %9916 = vmatprep.subr.bf16.mxu0 0
  %9917 = vmatpush1.bf16.msra.mxu0 0
  %9918 = vmatprep.subr.bf16.mxu0 0
  %9919 = vmatpush1.bf16.msra.mxu0 0
  %9920 = vmatprep.mubr.bf16.mxu0 0
  %9921 = vmatmul.mubr.bf16.gmra.mrb[0].mxu0 %v9821
  %v9922 = vpop.f32.mrb[0].mxu0
  %v9923 = vadd.f32 0.0, %v9922
  %v9924 = vpop.f32.mrb[0].mxu0
  %v9925 = vadd.f32 0.0, %v9924
  %v9926 = vpop.f32.mrb[0].mxu0
  %v9927 = vpop.f32.mrb[0].mxu0
  %9928 = vdwg.mxu0
  %9929 = vmatprep.subr.bf16.mxu0 %v9839
  %9930 = vmatpush1.bf16.msra.mxu0 %v9836
  %9931 = vmatprep.subr.bf16.mxu0 0
  %9932 = vmatpush1.bf16.msra.mxu0 0
  %9933 = vmatprep.subr.bf16.mxu0 0
  %9934 = vmatpush1.bf16.msra.mxu0 0
  %9935 = vmatprep.subr.bf16.mxu0 0
  %9936 = vmatpush1.bf16.msra.mxu0 0
  %9937 = vmatprep.subr.bf16.mxu0 0
  %9938 = vmatpush1.bf16.msra.mxu0 0
  %9939 = vmatprep.subr.bf16.mxu0 0
  %9940 = vmatpush1.bf16.msra.mxu0 0
  %9941 = vmatprep.subr.bf16.mxu0 0
  %9942 = vmatpush1.bf16.msra.mxu0 0
  %9943 = vmatprep.subr.bf16.mxu0 0
  %9944 = vmatpush1.bf16.msra.mxu0 0
  %9945 = vmatprep.subr.bf16.mxu0 0
  %9946 = vmatpush1.bf16.msra.mxu0 0
  %9947 = vmatprep.subr.bf16.mxu0 0
  %9948 = vmatpush1.bf16.msra.mxu0 0
  %9949 = vmatprep.subr.bf16.mxu0 0
  %9950 = vmatpush1.bf16.msra.mxu0 0
  %9951 = vmatprep.subr.bf16.mxu0 0
  %9952 = vmatpush1.bf16.msra.mxu0 0
  %9953 = vmatprep.subr.bf16.mxu0 0
  %9954 = vmatpush1.bf16.msra.mxu0 0
  %9955 = vmatprep.subr.bf16.mxu0 0
  %9956 = vmatpush1.bf16.msra.mxu0 0
  %9957 = vmatprep.subr.bf16.mxu0 0
  %9958 = vmatpush1.bf16.msra.mxu0 0
  %9959 = vmatprep.subr.bf16.mxu0 0
  %9960 = vmatpush1.bf16.msra.mxu0 0
  %9961 = vmatprep.mubr.bf16.mxu0 0
  %9962 = vmatmul.mubr.bf16.gmra.mrb[0].mxu0 %v9821
  %v9963 = vpop.f32.mrb[0].mxu0
  %v9964 = vadd.f32 0.0, %v9963
  %v9965 = vpop.f32.mrb[0].mxu0
  %v9966 = vadd.f32 0.0, %v9965
  %v9967 = vpop.f32.mrb[0].mxu0
  %v9968 = vpop.f32.mrb[0].mxu0
  %9969 = vdwg.mxu0
  %9970 = vmatprep.subr.bf16.mxu0 %v9845
  %9971 = vmatpush1.bf16.msra.mxu0 %v9842
  %9972 = vmatprep.subr.bf16.mxu0 0
  %9973 = vmatpush1.bf16.msra.mxu0 0
  %9974 = vmatprep.subr.bf16.mxu0 0
  %9975 = vmatpush1.bf16.msra.mxu0 0
  %9976 = vmatprep.subr.bf16.mxu0 0
  %9977 = vmatpush1.bf16.msra.mxu0 0
  %9978 = vmatprep.subr.bf16.mxu0 0
  %9979 = vmatpush1.bf16.msra.mxu0 0
  %9980 = vmatprep.subr.bf16.mxu0 0
  %9981 = vmatpush1.bf16.msra.mxu0 0
  %9982 = vmatprep.subr.bf16.mxu0 0
  %9983 = vmatpush1.bf16.msra.mxu0 0
  %9984 = vmatprep.subr.bf16.mxu0 0
  %9985 = vmatpush1.bf16.msra.mxu0 0
  %9986 = vmatprep.subr.bf16.mxu0 0
  %9987 = vmatpush1.bf16.msra.mxu0 0
  %9988 = vmatprep.subr.bf16.mxu0 0
  %9989 = vmatpush1.bf16.msra.mxu0 0
  %9990 = vmatprep.subr.bf16.mxu0 0
  %9991 = vmatpush1.bf16.msra.mxu0 0
  %9992 = vmatprep.subr.bf16.mxu0 0
  %9993 = vmatpush1.bf16.msra.mxu0 0
  %9994 = vmatprep.subr.bf16.mxu0 0
  %9995 = vmatpush1.bf16.msra.mxu0 0
  %9996 = vmatprep.subr.bf16.mxu0 0
  %9997 = vmatpush1.bf16.msra.mxu0 0
  %9998 = vmatprep.subr.bf16.mxu0 0
  %9999 = vmatpush1.bf16.msra.mxu0 0
  %10000 = vmatprep.subr.bf16.mxu0 0
  %10001 = vmatpush1.bf16.msra.mxu0 0
  %10002 = vmatprep.mubr.bf16.mxu0 0
  %10003 = vmatmul.mubr.bf16.gmra.mrb[0].mxu0 %v9821
  %v10004 = vpop.f32.mrb[0].mxu0
  %v10005 = vadd.f32 0.0, %v10004
  %v10006 = vpop.f32.mrb[0].mxu0
  %v10007 = vadd.f32 0.0, %v10006
  %v10008 = vpop.f32.mrb[0].mxu0
  %v10009 = vpop.f32.mrb[0].mxu0
  %10010 = vdwg.mxu0
  %v10011 = vadd.f32 %v9786, %v9882
  %v10012 = vadd.f32 %v9787, %v9884
  %v10013 = vadd.f32 %v9788, %v9923
  %v10014 = vadd.f32 %v9789, %v9925
  %v10015 = vadd.f32 %v9790, %v9964
  %v10016 = vadd.f32 %v9791, %v9966
  %v10017 = vadd.f32 %v9792, %v10005
  %v10018 = vadd.f32 %v9793, %v10007
  %10019 = vrot.lane.b32.xlu0 %v9560, 118
  %v10020 = vpop.permute.xlu0 %10019
  %10021 = vrot.lane.b32.xlu0 %v9561, 118
  %v10022 = vpop.permute.xlu0 %10021
  %10023 = vrot.lane.b32.xlu0 %v9562, 118
  %v10024 = vpop.permute.xlu0 %10023
  %10025 = vrot.lane.b32.xlu0 %v9563, 118
  %v10026 = vpop.permute.xlu0 %10025
  %10027 = vrot.lane.b32.xlu0 %v9564, 118
  %v10028 = vpop.permute.xlu0 %10027
  %10029 = vrot.lane.b32.xlu0 %v9565, 118
  %v10030 = vpop.permute.xlu0 %10029
  %10031 = vrot.lane.b32.xlu0 %v9566, 118
  %v10032 = vpop.permute.xlu0 %10031
  %10033 = vrot.lane.b32.xlu0 %v9567, 118
  %v10034 = vpop.permute.xlu0 %10033
  %10035 = vrot.lane.b32.xlu0 %v9568, 118
  %v10036 = vpop.permute.xlu0 %10035
  %v10037 = vsel %vm3779, %v10020, %v10022
  %v10038 = vsel %vm3779, %v10022, %v10024
  %v10039 = vsel %vm3779, %v10024, %v10026
  %v10040 = vsel %vm3779, %v10026, %v10028
  %v10041 = vsel %vm3779, %v10028, %v10030
  %v10042 = vsel %vm3779, %v10030, %v10032
  %v10043 = vsel %vm3779, %v10032, %v10034
  %v10044 = vsel %vm3779, %v10034, %v10036
  %v10046 = vsel %vm161, %v6370, 0
  %v10049 = vsel %vm165, %v10037, 0
  %v10052 = vsel %vm165, %v10038, 0
  %v10055 = vsel %vm165, %v10039, 0
  %v10058 = vsel %vm165, %v10040, 0
  %v10061 = vsel %vm165, %v10041, 0
  %v10064 = vsel %vm165, %v10042, 0
  %v10067 = vsel %vm165, %v10043, 0
  %v10070 = vsel %vm165, %v10044, 0
  %10072 = vmatprep.subr.bf16.mxu0 %v10052
  %10073 = vmatpush1.bf16.msra.mxu0 %v10049
  %10074 = vmatprep.subr.bf16.mxu0 0
  %10075 = vmatpush1.bf16.msra.mxu0 0
  %10076 = vmatprep.subr.bf16.mxu0 0
  %10077 = vmatpush1.bf16.msra.mxu0 0
  %10078 = vmatprep.subr.bf16.mxu0 0
  %10079 = vmatpush1.bf16.msra.mxu0 0
  %10080 = vmatprep.subr.bf16.mxu0 0
  %10081 = vmatpush1.bf16.msra.mxu0 0
  %10082 = vmatprep.subr.bf16.mxu0 0
  %10083 = vmatpush1.bf16.msra.mxu0 0
  %10084 = vmatprep.subr.bf16.mxu0 0
  %10085 = vmatpush1.bf16.msra.mxu0 0
  %10086 = vmatprep.subr.bf16.mxu0 0
  %10087 = vmatpush1.bf16.msra.mxu0 0
  %10088 = vmatprep.subr.bf16.mxu0 0
  %10089 = vmatpush1.bf16.msra.mxu0 0
  %10090 = vmatprep.subr.bf16.mxu0 0
  %10091 = vmatpush1.bf16.msra.mxu0 0
  %10092 = vmatprep.subr.bf16.mxu0 0
  %10093 = vmatpush1.bf16.msra.mxu0 0
  %10094 = vmatprep.subr.bf16.mxu0 0
  %10095 = vmatpush1.bf16.msra.mxu0 0
  %10096 = vmatprep.subr.bf16.mxu0 0
  %10097 = vmatpush1.bf16.msra.mxu0 0
  %10098 = vmatprep.subr.bf16.mxu0 0
  %10099 = vmatpush1.bf16.msra.mxu0 0
  %10100 = vmatprep.subr.bf16.mxu0 0
  %10101 = vmatpush1.bf16.msra.mxu0 0
  %10102 = vmatprep.subr.bf16.mxu0 0
  %10103 = vmatpush1.bf16.msra.mxu0 0
  %10104 = vmatprep.mubr.bf16.mxu0 0
  %10105 = vmatmul.mubr.bf16.gmra.mrb[0].mxu0 %v10046
  %v10106 = vpop.f32.mrb[0].mxu0
  %v10107 = vadd.f32 0.0, %v10106
  %v10108 = vpop.f32.mrb[0].mxu0
  %v10109 = vadd.f32 0.0, %v10108
  %v10110 = vpop.f32.mrb[0].mxu0
  %v10111 = vpop.f32.mrb[0].mxu0
  %10112 = vdwg.mxu0
  %10113 = vmatprep.subr.bf16.mxu0 %v10058
  %10114 = vmatpush1.bf16.msra.mxu0 %v10055
  %10115 = vmatprep.subr.bf16.mxu0 0
  %10116 = vmatpush1.bf16.msra.mxu0 0
  %10117 = vmatprep.subr.bf16.mxu0 0
  %10118 = vmatpush1.bf16.msra.mxu0 0
  %10119 = vmatprep.subr.bf16.mxu0 0
  %10120 = vmatpush1.bf16.msra.mxu0 0
  %10121 = vmatprep.subr.bf16.mxu0 0
  %10122 = vmatpush1.bf16.msra.mxu0 0
  %10123 = vmatprep.subr.bf16.mxu0 0
  %10124 = vmatpush1.bf16.msra.mxu0 0
  %10125 = vmatprep.subr.bf16.mxu0 0
  %10126 = vmatpush1.bf16.msra.mxu0 0
  %10127 = vmatprep.subr.bf16.mxu0 0
  %10128 = vmatpush1.bf16.msra.mxu0 0
  %10129 = vmatprep.subr.bf16.mxu0 0
  %10130 = vmatpush1.bf16.msra.mxu0 0
  %10131 = vmatprep.subr.bf16.mxu0 0
  %10132 = vmatpush1.bf16.msra.mxu0 0
  %10133 = vmatprep.subr.bf16.mxu0 0
  %10134 = vmatpush1.bf16.msra.mxu0 0
  %10135 = vmatprep.subr.bf16.mxu0 0
  %10136 = vmatpush1.bf16.msra.mxu0 0
  %10137 = vmatprep.subr.bf16.mxu0 0
  %10138 = vmatpush1.bf16.msra.mxu0 0
  %10139 = vmatprep.subr.bf16.mxu0 0
  %10140 = vmatpush1.bf16.msra.mxu0 0
  %10141 = vmatprep.subr.bf16.mxu0 0
  %10142 = vmatpush1.bf16.msra.mxu0 0
  %10143 = vmatprep.subr.bf16.mxu0 0
  %10144 = vmatpush1.bf16.msra.mxu0 0
  %10145 = vmatprep.mubr.bf16.mxu0 0
  %10146 = vmatmul.mubr.bf16.gmra.mrb[0].mxu0 %v10046
  %v10147 = vpop.f32.mrb[0].mxu0
  %v10148 = vadd.f32 0.0, %v10147
  %v10149 = vpop.f32.mrb[0].mxu0
  %v10150 = vadd.f32 0.0, %v10149
  %v10151 = vpop.f32.mrb[0].mxu0
  %v10152 = vpop.f32.mrb[0].mxu0
  %10153 = vdwg.mxu0
  %10154 = vmatprep.subr.bf16.mxu0 %v10064
  %10155 = vmatpush1.bf16.msra.mxu0 %v10061
  %10156 = vmatprep.subr.bf16.mxu0 0
  %10157 = vmatpush1.bf16.msra.mxu0 0
  %10158 = vmatprep.subr.bf16.mxu0 0
  %10159 = vmatpush1.bf16.msra.mxu0 0
  %10160 = vmatprep.subr.bf16.mxu0 0
  %10161 = vmatpush1.bf16.msra.mxu0 0
  %10162 = vmatprep.subr.bf16.mxu0 0
  %10163 = vmatpush1.bf16.msra.mxu0 0
  %10164 = vmatprep.subr.bf16.mxu0 0
  %10165 = vmatpush1.bf16.msra.mxu0 0
  %10166 = vmatprep.subr.bf16.mxu0 0
  %10167 = vmatpush1.bf16.msra.mxu0 0
  %10168 = vmatprep.subr.bf16.mxu0 0
  %10169 = vmatpush1.bf16.msra.mxu0 0
  %10170 = vmatprep.subr.bf16.mxu0 0
  %10171 = vmatpush1.bf16.msra.mxu0 0
  %10172 = vmatprep.subr.bf16.mxu0 0
  %10173 = vmatpush1.bf16.msra.mxu0 0
  %10174 = vmatprep.subr.bf16.mxu0 0
  %10175 = vmatpush1.bf16.msra.mxu0 0
  %10176 = vmatprep.subr.bf16.mxu0 0
  %10177 = vmatpush1.bf16.msra.mxu0 0
  %10178 = vmatprep.subr.bf16.mxu0 0
  %10179 = vmatpush1.bf16.msra.mxu0 0
  %10180 = vmatprep.subr.bf16.mxu0 0
  %10181 = vmatpush1.bf16.msra.mxu0 0
  %10182 = vmatprep.subr.bf16.mxu0 0
  %10183 = vmatpush1.bf16.msra.mxu0 0
  %10184 = vmatprep.subr.bf16.mxu0 0
  %10185 = vmatpush1.bf16.msra.mxu0 0
  %10186 = vmatprep.mubr.bf16.mxu0 0
  %10187 = vmatmul.mubr.bf16.gmra.mrb[0].mxu0 %v10046
  %v10188 = vpop.f32.mrb[0].mxu0
  %v10189 = vadd.f32 0.0, %v10188
  %v10190 = vpop.f32.mrb[0].mxu0
  %v10191 = vadd.f32 0.0, %v10190
  %v10192 = vpop.f32.mrb[0].mxu0
  %v10193 = vpop.f32.mrb[0].mxu0
  %10194 = vdwg.mxu0
  %10195 = vmatprep.subr.bf16.mxu0 %v10070
  %10196 = vmatpush1.bf16.msra.mxu0 %v10067
  %10197 = vmatprep.subr.bf16.mxu0 0
  %10198 = vmatpush1.bf16.msra.mxu0 0
  %10199 = vmatprep.subr.bf16.mxu0 0
  %10200 = vmatpush1.bf16.msra.mxu0 0
  %10201 = vmatprep.subr.bf16.mxu0 0
  %10202 = vmatpush1.bf16.msra.mxu0 0
  %10203 = vmatprep.subr.bf16.mxu0 0
  %10204 = vmatpush1.bf16.msra.mxu0 0
  %10205 = vmatprep.subr.bf16.mxu0 0
  %10206 = vmatpush1.bf16.msra.mxu0 0
  %10207 = vmatprep.subr.bf16.mxu0 0
  %10208 = vmatpush1.bf16.msra.mxu0 0
  %10209 = vmatprep.subr.bf16.mxu0 0
  %10210 = vmatpush1.bf16.msra.mxu0 0
  %10211 = vmatprep.subr.bf16.mxu0 0
  %10212 = vmatpush1.bf16.msra.mxu0 0
  %10213 = vmatprep.subr.bf16.mxu0 0
  %10214 = vmatpush1.bf16.msra.mxu0 0
  %10215 = vmatprep.subr.bf16.mxu0 0
  %10216 = vmatpush1.bf16.msra.mxu0 0
  %10217 = vmatprep.subr.bf16.mxu0 0
  %10218 = vmatpush1.bf16.msra.mxu0 0
  %10219 = vmatprep.subr.bf16.mxu0 0
  %10220 = vmatpush1.bf16.msra.mxu0 0
  %10221 = vmatprep.subr.bf16.mxu0 0
  %10222 = vmatpush1.bf16.msra.mxu0 0
  %10223 = vmatprep.subr.bf16.mxu0 0
  %10224 = vmatpush1.bf16.msra.mxu0 0
  %10225 = vmatprep.subr.bf16.mxu0 0
  %10226 = vmatpush1.bf16.msra.mxu0 0
  %10227 = vmatprep.mubr.bf16.mxu0 0
  %10228 = vmatmul.mubr.bf16.gmra.mrb[0].mxu0 %v10046
  %v10229 = vpop.f32.mrb[0].mxu0
  %v10230 = vadd.f32 0.0, %v10229
  %v10231 = vpop.f32.mrb[0].mxu0
  %v10232 = vadd.f32 0.0, %v10231
  %v10233 = vpop.f32.mrb[0].mxu0
  %v10234 = vpop.f32.mrb[0].mxu0
  %10235 = vdwg.mxu0
  %v10236 = vadd.f32 %v10011, %v10107
  %v10237 = vadd.f32 %v10012, %v10109
  %v10238 = vadd.f32 %v10013, %v10148
  %v10239 = vadd.f32 %v10014, %v10150
  %v10240 = vadd.f32 %v10015, %v10189
  %v10241 = vadd.f32 %v10016, %v10191
  %v10242 = vadd.f32 %v10017, %v10230
  %v10243 = vadd.f32 %v10018, %v10232
  %10244 = vrot.lane.b32.xlu0 %v9560, 117
  %v10245 = vpop.permute.xlu0 %10244
  %10246 = vrot.lane.b32.xlu0 %v9561, 117
  %v10247 = vpop.permute.xlu0 %10246
  %10248 = vrot.lane.b32.xlu0 %v9562, 117
  %v10249 = vpop.permute.xlu0 %10248
  %10250 = vrot.lane.b32.xlu0 %v9563, 117
  %v10251 = vpop.permute.xlu0 %10250
  %10252 = vrot.lane.b32.xlu0 %v9564, 117
  %v10253 = vpop.permute.xlu0 %10252
  %10254 = vrot.lane.b32.xlu0 %v9565, 117
  %v10255 = vpop.permute.xlu0 %10254
  %10256 = vrot.lane.b32.xlu0 %v9566, 117
  %v10257 = vpop.permute.xlu0 %10256
  %10258 = vrot.lane.b32.xlu0 %v9567, 117
  %v10259 = vpop.permute.xlu0 %10258
  %10260 = vrot.lane.b32.xlu0 %v9568, 117
  %v10261 = vpop.permute.xlu0 %10260
  %v10262 = vsel %vm4005, %v10245, %v10247
  %v10263 = vsel %vm4005, %v10247, %v10249
  %v10264 = vsel %vm4005, %v10249, %v10251
  %v10265 = vsel %vm4005, %v10251, %v10253
  %v10266 = vsel %vm4005, %v10253, %v10255
  %v10267 = vsel %vm4005, %v10255, %v10257
  %v10268 = vsel %vm4005, %v10257, %v10259
  %v10269 = vsel %vm4005, %v10259, %v10261
  %v10271 = vsel %vm161, %v6371, 0
  %v10274 = vsel %vm165, %v10262, 0
  %v10277 = vsel %vm165, %v10263, 0
  %v10280 = vsel %vm165, %v10264, 0
  %v10283 = vsel %vm165, %v10265, 0
  %v10286 = vsel %vm165, %v10266, 0
  %v10289 = vsel %vm165, %v10267, 0
  %v10292 = vsel %vm165, %v10268, 0
  %v10295 = vsel %vm165, %v10269, 0
  %10297 = vmatprep.subr.bf16.mxu0 %v10277
  %10298 = vmatpush1.bf16.msra.mxu0 %v10274
  %10299 = vmatprep.subr.bf16.mxu0 0
  %10300 = vmatpush1.bf16.msra.mxu0 0
  %10301 = vmatprep.subr.bf16.mxu0 0
  %10302 = vmatpush1.bf16.msra.mxu0 0
  %10303 = vmatprep.subr.bf16.mxu0 0
  %10304 = vmatpush1.bf16.msra.mxu0 0
  %10305 = vmatprep.subr.bf16.mxu0 0
  %10306 = vmatpush1.bf16.msra.mxu0 0
  %10307 = vmatprep.subr.bf16.mxu0 0
  %10308 = vmatpush1.bf16.msra.mxu0 0
  %10309 = vmatprep.subr.bf16.mxu0 0
  %10310 = vmatpush1.bf16.msra.mxu0 0
  %10311 = vmatprep.subr.bf16.mxu0 0
  %10312 = vmatpush1.bf16.msra.mxu0 0
  %10313 = vmatprep.subr.bf16.mxu0 0
  %10314 = vmatpush1.bf16.msra.mxu0 0
  %10315 = vmatprep.subr.bf16.mxu0 0
  %10316 = vmatpush1.bf16.msra.mxu0 0
  %10317 = vmatprep.subr.bf16.mxu0 0
  %10318 = vmatpush1.bf16.msra.mxu0 0
  %10319 = vmatprep.subr.bf16.mxu0 0
  %10320 = vmatpush1.bf16.msra.mxu0 0
  %10321 = vmatprep.subr.bf16.mxu0 0
  %10322 = vmatpush1.bf16.msra.mxu0 0
  %10323 = vmatprep.subr.bf16.mxu0 0
  %10324 = vmatpush1.bf16.msra.mxu0 0
  %10325 = vmatprep.subr.bf16.mxu0 0
  %10326 = vmatpush1.bf16.msra.mxu0 0
  %10327 = vmatprep.subr.bf16.mxu0 0
  %10328 = vmatpush1.bf16.msra.mxu0 0
  %10329 = vmatprep.mubr.bf16.mxu0 0
  %10330 = vmatmul.mubr.bf16.gmra.mrb[0].mxu0 %v10271
  %v10331 = vpop.f32.mrb[0].mxu0
  %v10332 = vadd.f32 0.0, %v10331
  %v10333 = vpop.f32.mrb[0].mxu0
  %v10334 = vadd.f32 0.0, %v10333
  %v10335 = vpop.f32.mrb[0].mxu0
  %v10336 = vpop.f32.mrb[0].mxu0
  %10337 = vdwg.mxu0
  %10338 = vmatprep.subr.bf16.mxu0 %v10283
  %10339 = vmatpush1.bf16.msra.mxu0 %v10280
  %10340 = vmatprep.subr.bf16.mxu0 0
  %10341 = vmatpush1.bf16.msra.mxu0 0
  %10342 = vmatprep.subr.bf16.mxu0 0
  %10343 = vmatpush1.bf16.msra.mxu0 0
  %10344 = vmatprep.subr.bf16.mxu0 0
  %10345 = vmatpush1.bf16.msra.mxu0 0
  %10346 = vmatprep.subr.bf16.mxu0 0
  %10347 = vmatpush1.bf16.msra.mxu0 0
  %10348 = vmatprep.subr.bf16.mxu0 0
  %10349 = vmatpush1.bf16.msra.mxu0 0
  %10350 = vmatprep.subr.bf16.mxu0 0
  %10351 = vmatpush1.bf16.msra.mxu0 0
  %10352 = vmatprep.subr.bf16.mxu0 0
  %10353 = vmatpush1.bf16.msra.mxu0 0
  %10354 = vmatprep.subr.bf16.mxu0 0
  %10355 = vmatpush1.bf16.msra.mxu0 0
  %10356 = vmatprep.subr.bf16.mxu0 0
  %10357 = vmatpush1.bf16.msra.mxu0 0
  %10358 = vmatprep.subr.bf16.mxu0 0
  %10359 = vmatpush1.bf16.msra.mxu0 0
  %10360 = vmatprep.subr.bf16.mxu0 0
  %10361 = vmatpush1.bf16.msra.mxu0 0
  %10362 = vmatprep.subr.bf16.mxu0 0
  %10363 = vmatpush1.bf16.msra.mxu0 0
  %10364 = vmatprep.subr.bf16.mxu0 0
  %10365 = vmatpush1.bf16.msra.mxu0 0
  %10366 = vmatprep.subr.bf16.mxu0 0
  %10367 = vmatpush1.bf16.msra.mxu0 0
  %10368 = vmatprep.subr.bf16.mxu0 0
  %10369 = vmatpush1.bf16.msra.mxu0 0
  %10370 = vmatprep.mubr.bf16.mxu0 0
  %10371 = vmatmul.mubr.bf16.gmra.mrb[0].mxu0 %v10271
  %v10372 = vpop.f32.mrb[0].mxu0
  %v10373 = vadd.f32 0.0, %v10372
  %v10374 = vpop.f32.mrb[0].mxu0
  %v10375 = vadd.f32 0.0, %v10374
  %v10376 = vpop.f32.mrb[0].mxu0
  %v10377 = vpop.f32.mrb[0].mxu0
  %10378 = vdwg.mxu0
  %10379 = vmatprep.subr.bf16.mxu0 %v10289
  %10380 = vmatpush1.bf16.msra.mxu0 %v10286
  %10381 = vmatprep.subr.bf16.mxu0 0
  %10382 = vmatpush1.bf16.msra.mxu0 0
  %10383 = vmatprep.subr.bf16.mxu0 0
  %10384 = vmatpush1.bf16.msra.mxu0 0
  %10385 = vmatprep.subr.bf16.mxu0 0
  %10386 = vmatpush1.bf16.msra.mxu0 0
  %10387 = vmatprep.subr.bf16.mxu0 0
  %10388 = vmatpush1.bf16.msra.mxu0 0
  %10389 = vmatprep.subr.bf16.mxu0 0
  %10390 = vmatpush1.bf16.msra.mxu0 0
  %10391 = vmatprep.subr.bf16.mxu0 0
  %10392 = vmatpush1.bf16.msra.mxu0 0
  %10393 = vmatprep.subr.bf16.mxu0 0
  %10394 = vmatpush1.bf16.msra.mxu0 0
  %10395 = vmatprep.subr.bf16.mxu0 0
  %10396 = vmatpush1.bf16.msra.mxu0 0
  %10397 = vmatprep.subr.bf16.mxu0 0
  %10398 = vmatpush1.bf16.msra.mxu0 0
  %10399 = vmatprep.subr.bf16.mxu0 0
  %10400 = vmatpush1.bf16.msra.mxu0 0
  %10401 = vmatprep.subr.bf16.mxu0 0
  %10402 = vmatpush1.bf16.msra.mxu0 0
  %10403 = vmatprep.subr.bf16.mxu0 0
  %10404 = vmatpush1.bf16.msra.mxu0 0
  %10405 = vmatprep.subr.bf16.mxu0 0
  %10406 = vmatpush1.bf16.msra.mxu0 0
  %10407 = vmatprep.subr.bf16.mxu0 0
  %10408 = vmatpush1.bf16.msra.mxu0 0
  %10409 = vmatprep.subr.bf16.mxu0 0
  %10410 = vmatpush1.bf16.msra.mxu0 0
  %10411 = vmatprep.mubr.bf16.mxu0 0
  %10412 = vmatmul.mubr.bf16.gmra.mrb[0].mxu0 %v10271
  %v10413 = vpop.f32.mrb[0].mxu0
  %v10414 = vadd.f32 0.0, %v10413
  %v10415 = vpop.f32.mrb[0].mxu0
  %v10416 = vadd.f32 0.0, %v10415
  %v10417 = vpop.f32.mrb[0].mxu0
  %v10418 = vpop.f32.mrb[0].mxu0
  %10419 = vdwg.mxu0
  %10420 = vmatprep.subr.bf16.mxu0 %v10295
  %10421 = vmatpush1.bf16.msra.mxu0 %v10292
  %10422 = vmatprep.subr.bf16.mxu0 0
  %10423 = vmatpush1.bf16.msra.mxu0 0
  %10424 = vmatprep.subr.bf16.mxu0 0
  %10425 = vmatpush1.bf16.msra.mxu0 0
  %10426 = vmatprep.subr.bf16.mxu0 0
  %10427 = vmatpush1.bf16.msra.mxu0 0
  %10428 = vmatprep.subr.bf16.mxu0 0
  %10429 = vmatpush1.bf16.msra.mxu0 0
  %10430 = vmatprep.subr.bf16.mxu0 0
  %10431 = vmatpush1.bf16.msra.mxu0 0
  %10432 = vmatprep.subr.bf16.mxu0 0
  %10433 = vmatpush1.bf16.msra.mxu0 0
  %10434 = vmatprep.subr.bf16.mxu0 0
  %10435 = vmatpush1.bf16.msra.mxu0 0
  %10436 = vmatprep.subr.bf16.mxu0 0
  %10437 = vmatpush1.bf16.msra.mxu0 0
  %10438 = vmatprep.subr.bf16.mxu0 0
  %10439 = vmatpush1.bf16.msra.mxu0 0
  %10440 = vmatprep.subr.bf16.mxu0 0
  %10441 = vmatpush1.bf16.msra.mxu0 0
  %10442 = vmatprep.subr.bf16.mxu0 0
  %10443 = vmatpush1.bf16.msra.mxu0 0
  %10444 = vmatprep.subr.bf16.mxu0 0
  %10445 = vmatpush1.bf16.msra.mxu0 0
  %10446 = vmatprep.subr.bf16.mxu0 0
  %10447 = vmatpush1.bf16.msra.mxu0 0
  %10448 = vmatprep.subr.bf16.mxu0 0
  %10449 = vmatpush1.bf16.msra.mxu0 0
  %10450 = vmatprep.subr.bf16.mxu0 0
  %10451 = vmatpush1.bf16.msra.mxu0 0
  %10452 = vmatprep.mubr.bf16.mxu0 0
  %10453 = vmatmul.mubr.bf16.gmra.mrb[0].mxu0 %v10271
  %v10454 = vpop.f32.mrb[0].mxu0
  %v10455 = vadd.f32 0.0, %v10454
  %v10456 = vpop.f32.mrb[0].mxu0
  %v10457 = vadd.f32 0.0, %v10456
  %v10458 = vpop.f32.mrb[0].mxu0
  %v10459 = vpop.f32.mrb[0].mxu0
  %10460 = vdwg.mxu0
  %v10461 = vadd.f32 %v10236, %v10332
  %v10462 = vadd.f32 %v10237, %v10334
  %v10463 = vadd.f32 %v10238, %v10373
  %v10464 = vadd.f32 %v10239, %v10375
  %v10465 = vadd.f32 %v10240, %v10414
  %v10466 = vadd.f32 %v10241, %v10416
  %v10467 = vadd.f32 %v10242, %v10455
  %v10468 = vadd.f32 %v10243, %v10457
  %10469 = vrot.lane.b32.xlu0 %v9560, 39
  %v10470 = vpop.permute.xlu0 %10469
  %10471 = vrot.lane.b32.xlu0 %v9561, 39
  %v10472 = vpop.permute.xlu0 %10471
  %10473 = vrot.lane.b32.xlu0 %v9562, 39
  %v10474 = vpop.permute.xlu0 %10473
  %10475 = vrot.lane.b32.xlu0 %v9563, 39
  %v10476 = vpop.permute.xlu0 %10475
  %10477 = vrot.lane.b32.xlu0 %v9564, 39
  %v10478 = vpop.permute.xlu0 %10477
  %10479 = vrot.lane.b32.xlu0 %v9565, 39
  %v10480 = vpop.permute.xlu0 %10479
  %10481 = vrot.lane.b32.xlu0 %v9566, 39
  %v10482 = vpop.permute.xlu0 %10481
  %10483 = vrot.lane.b32.xlu0 %v9567, 39
  %v10484 = vpop.permute.xlu0 %10483
  %10485 = vrot.lane.b32.xlu0 %v9568, 39
  %v10486 = vpop.permute.xlu0 %10485
  %v10487 = vsel %vm4231, %v10470, %v10472
  %v10488 = vsel %vm4231, %v10472, %v10474
  %v10489 = vsel %vm4231, %v10474, %v10476
  %v10490 = vsel %vm4231, %v10476, %v10478
  %v10491 = vsel %vm4231, %v10478, %v10480
  %v10492 = vsel %vm4231, %v10480, %v10482
  %v10493 = vsel %vm4231, %v10482, %v10484
  %v10494 = vsel %vm4231, %v10484, %v10486
  %v10496 = vsel %vm161, %v6372, 0
  %v10499 = vsel %vm165, %v10487, 0
  %v10502 = vsel %vm165, %v10488, 0
  %v10505 = vsel %vm165, %v10489, 0
  %v10508 = vsel %vm165, %v10490, 0
  %v10511 = vsel %vm165, %v10491, 0
  %v10514 = vsel %vm165, %v10492, 0
  %v10517 = vsel %vm165, %v10493, 0
  %v10520 = vsel %vm165, %v10494, 0
  %10522 = vmatprep.subr.bf16.mxu0 %v10502
  %10523 = vmatpush1.bf16.msra.mxu0 %v10499
  %10524 = vmatprep.subr.bf16.mxu0 0
  %10525 = vmatpush1.bf16.msra.mxu0 0
  %10526 = vmatprep.subr.bf16.mxu0 0
  %10527 = vmatpush1.bf16.msra.mxu0 0
  %10528 = vmatprep.subr.bf16.mxu0 0
  %10529 = vmatpush1.bf16.msra.mxu0 0
  %10530 = vmatprep.subr.bf16.mxu0 0
  %10531 = vmatpush1.bf16.msra.mxu0 0
  %10532 = vmatprep.subr.bf16.mxu0 0
  %10533 = vmatpush1.bf16.msra.mxu0 0
  %10534 = vmatprep.subr.bf16.mxu0 0
  %10535 = vmatpush1.bf16.msra.mxu0 0
  %10536 = vmatprep.subr.bf16.mxu0 0
  %10537 = vmatpush1.bf16.msra.mxu0 0
  %10538 = vmatprep.subr.bf16.mxu0 0
  %10539 = vmatpush1.bf16.msra.mxu0 0
  %10540 = vmatprep.subr.bf16.mxu0 0
  %10541 = vmatpush1.bf16.msra.mxu0 0
  %10542 = vmatprep.subr.bf16.mxu0 0
  %10543 = vmatpush1.bf16.msra.mxu0 0
  %10544 = vmatprep.subr.bf16.mxu0 0
  %10545 = vmatpush1.bf16.msra.mxu0 0
  %10546 = vmatprep.subr.bf16.mxu0 0
  %10547 = vmatpush1.bf16.msra.mxu0 0
  %10548 = vmatprep.subr.bf16.mxu0 0
  %10549 = vmatpush1.bf16.msra.mxu0 0
  %10550 = vmatprep.subr.bf16.mxu0 0
  %10551 = vmatpush1.bf16.msra.mxu0 0
  %10552 = vmatprep.subr.bf16.mxu0 0
  %10553 = vmatpush1.bf16.msra.mxu0 0
  %10554 = vmatprep.mubr.bf16.mxu0 0
  %10555 = vmatmul.mubr.bf16.gmra.mrb[0].mxu0 %v10496
  %v10556 = vpop.f32.mrb[0].mxu0
  %v10557 = vadd.f32 0.0, %v10556
  %v10558 = vpop.f32.mrb[0].mxu0
  %v10559 = vadd.f32 0.0, %v10558
  %v10560 = vpop.f32.mrb[0].mxu0
  %v10561 = vpop.f32.mrb[0].mxu0
  %10562 = vdwg.mxu0
  %10563 = vmatprep.subr.bf16.mxu0 %v10508
  %10564 = vmatpush1.bf16.msra.mxu0 %v10505
  %10565 = vmatprep.subr.bf16.mxu0 0
  %10566 = vmatpush1.bf16.msra.mxu0 0
  %10567 = vmatprep.subr.bf16.mxu0 0
  %10568 = vmatpush1.bf16.msra.mxu0 0
  %10569 = vmatprep.subr.bf16.mxu0 0
  %10570 = vmatpush1.bf16.msra.mxu0 0
  %10571 = vmatprep.subr.bf16.mxu0 0
  %10572 = vmatpush1.bf16.msra.mxu0 0
  %10573 = vmatprep.subr.bf16.mxu0 0
  %10574 = vmatpush1.bf16.msra.mxu0 0
  %10575 = vmatprep.subr.bf16.mxu0 0
  %10576 = vmatpush1.bf16.msra.mxu0 0
  %10577 = vmatprep.subr.bf16.mxu0 0
  %10578 = vmatpush1.bf16.msra.mxu0 0
  %10579 = vmatprep.subr.bf16.mxu0 0
  %10580 = vmatpush1.bf16.msra.mxu0 0
  %10581 = vmatprep.subr.bf16.mxu0 0
  %10582 = vmatpush1.bf16.msra.mxu0 0
  %10583 = vmatprep.subr.bf16.mxu0 0
  %10584 = vmatpush1.bf16.msra.mxu0 0
  %10585 = vmatprep.subr.bf16.mxu0 0
  %10586 = vmatpush1.bf16.msra.mxu0 0
  %10587 = vmatprep.subr.bf16.mxu0 0
  %10588 = vmatpush1.bf16.msra.mxu0 0
  %10589 = vmatprep.subr.bf16.mxu0 0
  %10590 = vmatpush1.bf16.msra.mxu0 0
  %10591 = vmatprep.subr.bf16.mxu0 0
  %10592 = vmatpush1.bf16.msra.mxu0 0
  %10593 = vmatprep.subr.bf16.mxu0 0
  %10594 = vmatpush1.bf16.msra.mxu0 0
  %10595 = vmatprep.mubr.bf16.mxu0 0
  %10596 = vmatmul.mubr.bf16.gmra.mrb[0].mxu0 %v10496
  %v10597 = vpop.f32.mrb[0].mxu0
  %v10598 = vadd.f32 0.0, %v10597
  %v10599 = vpop.f32.mrb[0].mxu0
  %v10600 = vadd.f32 0.0, %v10599
  %v10601 = vpop.f32.mrb[0].mxu0
  %v10602 = vpop.f32.mrb[0].mxu0
  %10603 = vdwg.mxu0
  %10604 = vmatprep.subr.bf16.mxu0 %v10514
  %10605 = vmatpush1.bf16.msra.mxu0 %v10511
  %10606 = vmatprep.subr.bf16.mxu0 0
  %10607 = vmatpush1.bf16.msra.mxu0 0
  %10608 = vmatprep.subr.bf16.mxu0 0
  %10609 = vmatpush1.bf16.msra.mxu0 0
  %10610 = vmatprep.subr.bf16.mxu0 0
  %10611 = vmatpush1.bf16.msra.mxu0 0
  %10612 = vmatprep.subr.bf16.mxu0 0
  %10613 = vmatpush1.bf16.msra.mxu0 0
  %10614 = vmatprep.subr.bf16.mxu0 0
  %10615 = vmatpush1.bf16.msra.mxu0 0
  %10616 = vmatprep.subr.bf16.mxu0 0
  %10617 = vmatpush1.bf16.msra.mxu0 0
  %10618 = vmatprep.subr.bf16.mxu0 0
  %10619 = vmatpush1.bf16.msra.mxu0 0
  %10620 = vmatprep.subr.bf16.mxu0 0
  %10621 = vmatpush1.bf16.msra.mxu0 0
  %10622 = vmatprep.subr.bf16.mxu0 0
  %10623 = vmatpush1.bf16.msra.mxu0 0
  %10624 = vmatprep.subr.bf16.mxu0 0
  %10625 = vmatpush1.bf16.msra.mxu0 0
  %10626 = vmatprep.subr.bf16.mxu0 0
  %10627 = vmatpush1.bf16.msra.mxu0 0
  %10628 = vmatprep.subr.bf16.mxu0 0
  %10629 = vmatpush1.bf16.msra.mxu0 0
  %10630 = vmatprep.subr.bf16.mxu0 0
  %10631 = vmatpush1.bf16.msra.mxu0 0
  %10632 = vmatprep.subr.bf16.mxu0 0
  %10633 = vmatpush1.bf16.msra.mxu0 0
  %10634 = vmatprep.subr.bf16.mxu0 0
  %10635 = vmatpush1.bf16.msra.mxu0 0
  %10636 = vmatprep.mubr.bf16.mxu0 0
  %10637 = vmatmul.mubr.bf16.gmra.mrb[0].mxu0 %v10496
  %v10638 = vpop.f32.mrb[0].mxu0
  %v10639 = vadd.f32 0.0, %v10638
  %v10640 = vpop.f32.mrb[0].mxu0
  %v10641 = vadd.f32 0.0, %v10640
  %v10642 = vpop.f32.mrb[0].mxu0
  %v10643 = vpop.f32.mrb[0].mxu0
  %10644 = vdwg.mxu0
  %10645 = vmatprep.subr.bf16.mxu0 %v10520
  %10646 = vmatpush1.bf16.msra.mxu0 %v10517
  %10647 = vmatprep.subr.bf16.mxu0 0
  %10648 = vmatpush1.bf16.msra.mxu0 0
  %10649 = vmatprep.subr.bf16.mxu0 0
  %10650 = vmatpush1.bf16.msra.mxu0 0
  %10651 = vmatprep.subr.bf16.mxu0 0
  %10652 = vmatpush1.bf16.msra.mxu0 0
  %10653 = vmatprep.subr.bf16.mxu0 0
  %10654 = vmatpush1.bf16.msra.mxu0 0
  %10655 = vmatprep.subr.bf16.mxu0 0
  %10656 = vmatpush1.bf16.msra.mxu0 0
  %10657 = vmatprep.subr.bf16.mxu0 0
  %10658 = vmatpush1.bf16.msra.mxu0 0
  %10659 = vmatprep.subr.bf16.mxu0 0
  %10660 = vmatpush1.bf16.msra.mxu0 0
  %10661 = vmatprep.subr.bf16.mxu0 0
  %10662 = vmatpush1.bf16.msra.mxu0 0
  %10663 = vmatprep.subr.bf16.mxu0 0
  %10664 = vmatpush1.bf16.msra.mxu0 0
  %10665 = vmatprep.subr.bf16.mxu0 0
  %10666 = vmatpush1.bf16.msra.mxu0 0
  %10667 = vmatprep.subr.bf16.mxu0 0
  %10668 = vmatpush1.bf16.msra.mxu0 0
  %10669 = vmatprep.subr.bf16.mxu0 0
  %10670 = vmatpush1.bf16.msra.mxu0 0
  %10671 = vmatprep.subr.bf16.mxu0 0
  %10672 = vmatpush1.bf16.msra.mxu0 0
  %10673 = vmatprep.subr.bf16.mxu0 0
  %10674 = vmatpush1.bf16.msra.mxu0 0
  %10675 = vmatprep.subr.bf16.mxu0 0
  %10676 = vmatpush1.bf16.msra.mxu0 0
  %10677 = vmatprep.mubr.bf16.mxu0 0
  %10678 = vmatmul.mubr.bf16.gmra.mrb[0].mxu0 %v10496
  %v10679 = vpop.f32.mrb[0].mxu0
  %v10680 = vadd.f32 0.0, %v10679
  %v10681 = vpop.f32.mrb[0].mxu0
  %v10682 = vadd.f32 0.0, %v10681
  %v10683 = vpop.f32.mrb[0].mxu0
  %v10684 = vpop.f32.mrb[0].mxu0
  %10685 = vdwg.mxu0
  %v10686 = vadd.f32 %v10461, %v10557
  %v10687 = vadd.f32 %v10462, %v10559
  %v10688 = vadd.f32 %v10463, %v10598
  %v10689 = vadd.f32 %v10464, %v10600
  %v10690 = vadd.f32 %v10465, %v10639
  %v10691 = vadd.f32 %v10466, %v10641
  %v10692 = vadd.f32 %v10467, %v10680
  %v10693 = vadd.f32 %v10468, %v10682
  %10694 = vrot.lane.b32.xlu0 %v9560, 38
  %v10695 = vpop.permute.xlu0 %10694
  %10696 = vrot.lane.b32.xlu0 %v9561, 38
  %v10697 = vpop.permute.xlu0 %10696
  %10698 = vrot.lane.b32.xlu0 %v9562, 38
  %v10699 = vpop.permute.xlu0 %10698
  %10700 = vrot.lane.b32.xlu0 %v9563, 38
  %v10701 = vpop.permute.xlu0 %10700
  %10702 = vrot.lane.b32.xlu0 %v9564, 38
  %v10703 = vpop.permute.xlu0 %10702
  %10704 = vrot.lane.b32.xlu0 %v9565, 38
  %v10705 = vpop.permute.xlu0 %10704
  %10706 = vrot.lane.b32.xlu0 %v9566, 38
  %v10707 = vpop.permute.xlu0 %10706
  %10708 = vrot.lane.b32.xlu0 %v9567, 38
  %v10709 = vpop.permute.xlu0 %10708
  %10710 = vrot.lane.b32.xlu0 %v9568, 38
  %v10711 = vpop.permute.xlu0 %10710
  %v10712 = vsel %vm4457, %v10695, %v10697
  %v10713 = vsel %vm4457, %v10697, %v10699
  %v10714 = vsel %vm4457, %v10699, %v10701
  %v10715 = vsel %vm4457, %v10701, %v10703
  %v10716 = vsel %vm4457, %v10703, %v10705
  %v10717 = vsel %vm4457, %v10705, %v10707
  %v10718 = vsel %vm4457, %v10707, %v10709
  %v10719 = vsel %vm4457, %v10709, %v10711
  %v10721 = vsel %vm161, %v6373, 0
  %v10724 = vsel %vm165, %v10712, 0
  %v10727 = vsel %vm165, %v10713, 0
  %v10730 = vsel %vm165, %v10714, 0
  %v10733 = vsel %vm165, %v10715, 0
  %v10736 = vsel %vm165, %v10716, 0
  %v10739 = vsel %vm165, %v10717, 0
  %v10742 = vsel %vm165, %v10718, 0
  %v10745 = vsel %vm165, %v10719, 0
  %10747 = vmatprep.subr.bf16.mxu0 %v10727
  %10748 = vmatpush1.bf16.msra.mxu0 %v10724
  %10749 = vmatprep.subr.bf16.mxu0 0
  %10750 = vmatpush1.bf16.msra.mxu0 0
  %10751 = vmatprep.subr.bf16.mxu0 0
  %10752 = vmatpush1.bf16.msra.mxu0 0
  %10753 = vmatprep.subr.bf16.mxu0 0
  %10754 = vmatpush1.bf16.msra.mxu0 0
  %10755 = vmatprep.subr.bf16.mxu0 0
  %10756 = vmatpush1.bf16.msra.mxu0 0
  %10757 = vmatprep.subr.bf16.mxu0 0
  %10758 = vmatpush1.bf16.msra.mxu0 0
  %10759 = vmatprep.subr.bf16.mxu0 0
  %10760 = vmatpush1.bf16.msra.mxu0 0
  %10761 = vmatprep.subr.bf16.mxu0 0
  %10762 = vmatpush1.bf16.msra.mxu0 0
  %10763 = vmatprep.subr.bf16.mxu0 0
  %10764 = vmatpush1.bf16.msra.mxu0 0
  %10765 = vmatprep.subr.bf16.mxu0 0
  %10766 = vmatpush1.bf16.msra.mxu0 0
  %10767 = vmatprep.subr.bf16.mxu0 0
  %10768 = vmatpush1.bf16.msra.mxu0 0
  %10769 = vmatprep.subr.bf16.mxu0 0
  %10770 = vmatpush1.bf16.msra.mxu0 0
  %10771 = vmatprep.subr.bf16.mxu0 0
  %10772 = vmatpush1.bf16.msra.mxu0 0
  %10773 = vmatprep.subr.bf16.mxu0 0
  %10774 = vmatpush1.bf16.msra.mxu0 0
  %10775 = vmatprep.subr.bf16.mxu0 0
  %10776 = vmatpush1.bf16.msra.mxu0 0
  %10777 = vmatprep.subr.bf16.mxu0 0
  %10778 = vmatpush1.bf16.msra.mxu0 0
  %10779 = vmatprep.mubr.bf16.mxu0 0
  %10780 = vmatmul.mubr.bf16.gmra.mrb[0].mxu0 %v10721
  %v10781 = vpop.f32.mrb[0].mxu0
  %v10782 = vadd.f32 0.0, %v10781
  %v10783 = vpop.f32.mrb[0].mxu0
  %v10784 = vadd.f32 0.0, %v10783
  %v10785 = vpop.f32.mrb[0].mxu0
  %v10786 = vpop.f32.mrb[0].mxu0
  %10787 = vdwg.mxu0
  %10788 = vmatprep.subr.bf16.mxu0 %v10733
  %10789 = vmatpush1.bf16.msra.mxu0 %v10730
  %10790 = vmatprep.subr.bf16.mxu0 0
  %10791 = vmatpush1.bf16.msra.mxu0 0
  %10792 = vmatprep.subr.bf16.mxu0 0
  %10793 = vmatpush1.bf16.msra.mxu0 0
  %10794 = vmatprep.subr.bf16.mxu0 0
  %10795 = vmatpush1.bf16.msra.mxu0 0
  %10796 = vmatprep.subr.bf16.mxu0 0
  %10797 = vmatpush1.bf16.msra.mxu0 0
  %10798 = vmatprep.subr.bf16.mxu0 0
  %10799 = vmatpush1.bf16.msra.mxu0 0
  %10800 = vmatprep.subr.bf16.mxu0 0
  %10801 = vmatpush1.bf16.msra.mxu0 0
  %10802 = vmatprep.subr.bf16.mxu0 0
  %10803 = vmatpush1.bf16.msra.mxu0 0
  %10804 = vmatprep.subr.bf16.mxu0 0
  %10805 = vmatpush1.bf16.msra.mxu0 0
  %10806 = vmatprep.subr.bf16.mxu0 0
  %10807 = vmatpush1.bf16.msra.mxu0 0
  %10808 = vmatprep.subr.bf16.mxu0 0
  %10809 = vmatpush1.bf16.msra.mxu0 0
  %10810 = vmatprep.subr.bf16.mxu0 0
  %10811 = vmatpush1.bf16.msra.mxu0 0
  %10812 = vmatprep.subr.bf16.mxu0 0
  %10813 = vmatpush1.bf16.msra.mxu0 0
  %10814 = vmatprep.subr.bf16.mxu0 0
  %10815 = vmatpush1.bf16.msra.mxu0 0
  %10816 = vmatprep.subr.bf16.mxu0 0
  %10817 = vmatpush1.bf16.msra.mxu0 0
  %10818 = vmatprep.subr.bf16.mxu0 0
  %10819 = vmatpush1.bf16.msra.mxu0 0
  %10820 = vmatprep.mubr.bf16.mxu0 0
  %10821 = vmatmul.mubr.bf16.gmra.mrb[0].mxu0 %v10721
  %v10822 = vpop.f32.mrb[0].mxu0
  %v10823 = vadd.f32 0.0, %v10822
  %v10824 = vpop.f32.mrb[0].mxu0
  %v10825 = vadd.f32 0.0, %v10824
  %v10826 = vpop.f32.mrb[0].mxu0
  %v10827 = vpop.f32.mrb[0].mxu0
  %10828 = vdwg.mxu0
  %10829 = vmatprep.subr.bf16.mxu0 %v10739
  %10830 = vmatpush1.bf16.msra.mxu0 %v10736
  %10831 = vmatprep.subr.bf16.mxu0 0
  %10832 = vmatpush1.bf16.msra.mxu0 0
  %10833 = vmatprep.subr.bf16.mxu0 0
  %10834 = vmatpush1.bf16.msra.mxu0 0
  %10835 = vmatprep.subr.bf16.mxu0 0
  %10836 = vmatpush1.bf16.msra.mxu0 0
  %10837 = vmatprep.subr.bf16.mxu0 0
  %10838 = vmatpush1.bf16.msra.mxu0 0
  %10839 = vmatprep.subr.bf16.mxu0 0
  %10840 = vmatpush1.bf16.msra.mxu0 0
  %10841 = vmatprep.subr.bf16.mxu0 0
  %10842 = vmatpush1.bf16.msra.mxu0 0
  %10843 = vmatprep.subr.bf16.mxu0 0
  %10844 = vmatpush1.bf16.msra.mxu0 0
  %10845 = vmatprep.subr.bf16.mxu0 0
  %10846 = vmatpush1.bf16.msra.mxu0 0
  %10847 = vmatprep.subr.bf16.mxu0 0
  %10848 = vmatpush1.bf16.msra.mxu0 0
  %10849 = vmatprep.subr.bf16.mxu0 0
  %10850 = vmatpush1.bf16.msra.mxu0 0
  %10851 = vmatprep.subr.bf16.mxu0 0
  %10852 = vmatpush1.bf16.msra.mxu0 0
  %10853 = vmatprep.subr.bf16.mxu0 0
  %10854 = vmatpush1.bf16.msra.mxu0 0
  %10855 = vmatprep.subr.bf16.mxu0 0
  %10856 = vmatpush1.bf16.msra.mxu0 0
  %10857 = vmatprep.subr.bf16.mxu0 0
  %10858 = vmatpush1.bf16.msra.mxu0 0
  %10859 = vmatprep.subr.bf16.mxu0 0
  %10860 = vmatpush1.bf16.msra.mxu0 0
  %10861 = vmatprep.mubr.bf16.mxu0 0
  %10862 = vmatmul.mubr.bf16.gmra.mrb[0].mxu0 %v10721
  %v10863 = vpop.f32.mrb[0].mxu0
  %v10864 = vadd.f32 0.0, %v10863
  %v10865 = vpop.f32.mrb[0].mxu0
  %v10866 = vadd.f32 0.0, %v10865
  %v10867 = vpop.f32.mrb[0].mxu0
  %v10868 = vpop.f32.mrb[0].mxu0
  %10869 = vdwg.mxu0
  %10870 = vmatprep.subr.bf16.mxu0 %v10745
  %10871 = vmatpush1.bf16.msra.mxu0 %v10742
  %10872 = vmatprep.subr.bf16.mxu0 0
  %10873 = vmatpush1.bf16.msra.mxu0 0
  %10874 = vmatprep.subr.bf16.mxu0 0
  %10875 = vmatpush1.bf16.msra.mxu0 0
  %10876 = vmatprep.subr.bf16.mxu0 0
  %10877 = vmatpush1.bf16.msra.mxu0 0
  %10878 = vmatprep.subr.bf16.mxu0 0
  %10879 = vmatpush1.bf16.msra.mxu0 0
  %10880 = vmatprep.subr.bf16.mxu0 0
  %10881 = vmatpush1.bf16.msra.mxu0 0
  %10882 = vmatprep.subr.bf16.mxu0 0
  %10883 = vmatpush1.bf16.msra.mxu0 0
  %10884 = vmatprep.subr.bf16.mxu0 0
  %10885 = vmatpush1.bf16.msra.mxu0 0
  %10886 = vmatprep.subr.bf16.mxu0 0
  %10887 = vmatpush1.bf16.msra.mxu0 0
  %10888 = vmatprep.subr.bf16.mxu0 0
  %10889 = vmatpush1.bf16.msra.mxu0 0
  %10890 = vmatprep.subr.bf16.mxu0 0
  %10891 = vmatpush1.bf16.msra.mxu0 0
  %10892 = vmatprep.subr.bf16.mxu0 0
  %10893 = vmatpush1.bf16.msra.mxu0 0
  %10894 = vmatprep.subr.bf16.mxu0 0
  %10895 = vmatpush1.bf16.msra.mxu0 0
  %10896 = vmatprep.subr.bf16.mxu0 0
  %10897 = vmatpush1.bf16.msra.mxu0 0
  %10898 = vmatprep.subr.bf16.mxu0 0
  %10899 = vmatpush1.bf16.msra.mxu0 0
  %10900 = vmatprep.subr.bf16.mxu0 0
  %10901 = vmatpush1.bf16.msra.mxu0 0
  %10902 = vmatprep.mubr.bf16.mxu0 0
  %10903 = vmatmul.mubr.bf16.gmra.mrb[0].mxu0 %v10721
  %v10904 = vpop.f32.mrb[0].mxu0
  %v10905 = vadd.f32 0.0, %v10904
  %v10906 = vpop.f32.mrb[0].mxu0
  %v10907 = vadd.f32 0.0, %v10906
  %v10908 = vpop.f32.mrb[0].mxu0
  %v10909 = vpop.f32.mrb[0].mxu0
  %10910 = vdwg.mxu0
  %v10911 = vadd.f32 %v10686, %v10782
  %v10912 = vadd.f32 %v10687, %v10784
  %v10913 = vadd.f32 %v10688, %v10823
  %v10914 = vadd.f32 %v10689, %v10825
  %v10915 = vadd.f32 %v10690, %v10864
  %v10916 = vadd.f32 %v10691, %v10866
  %v10917 = vadd.f32 %v10692, %v10905
  %v10918 = vadd.f32 %v10693, %v10907
  %10919 = vrot.lane.b32.xlu0 %v9560, 37
  %v10920 = vpop.permute.xlu0 %10919
  %10921 = vrot.lane.b32.xlu0 %v9561, 37
  %v10922 = vpop.permute.xlu0 %10921
  %10923 = vrot.lane.b32.xlu0 %v9562, 37
  %v10924 = vpop.permute.xlu0 %10923
  %10925 = vrot.lane.b32.xlu0 %v9563, 37
  %v10926 = vpop.permute.xlu0 %10925
  %10927 = vrot.lane.b32.xlu0 %v9564, 37
  %v10928 = vpop.permute.xlu0 %10927
  %10929 = vrot.lane.b32.xlu0 %v9565, 37
  %v10930 = vpop.permute.xlu0 %10929
  %10931 = vrot.lane.b32.xlu0 %v9566, 37
  %v10932 = vpop.permute.xlu0 %10931
  %10933 = vrot.lane.b32.xlu0 %v9567, 37
  %v10934 = vpop.permute.xlu0 %10933
  %10935 = vrot.lane.b32.xlu0 %v9568, 37
  %v10936 = vpop.permute.xlu0 %10935
  %v10937 = vsel %vm4683, %v10920, %v10922
  %v10938 = vsel %vm4683, %v10922, %v10924
  %v10939 = vsel %vm4683, %v10924, %v10926
  %v10940 = vsel %vm4683, %v10926, %v10928
  %v10941 = vsel %vm4683, %v10928, %v10930
  %v10942 = vsel %vm4683, %v10930, %v10932
  %v10943 = vsel %vm4683, %v10932, %v10934
  %v10944 = vsel %vm4683, %v10934, %v10936
  %v10946 = vsel %vm161, %v6374, 0
  %v10949 = vsel %vm165, %v10937, 0
  %v10952 = vsel %vm165, %v10938, 0
  %v10955 = vsel %vm165, %v10939, 0
  %v10958 = vsel %vm165, %v10940, 0
  %v10961 = vsel %vm165, %v10941, 0
  %v10964 = vsel %vm165, %v10942, 0
  %v10967 = vsel %vm165, %v10943, 0
  %v10970 = vsel %vm165, %v10944, 0
  %10972 = vmatprep.subr.bf16.mxu0 %v10952
  %10973 = vmatpush1.bf16.msra.mxu0 %v10949
  %10974 = vmatprep.subr.bf16.mxu0 0
  %10975 = vmatpush1.bf16.msra.mxu0 0
  %10976 = vmatprep.subr.bf16.mxu0 0
  %10977 = vmatpush1.bf16.msra.mxu0 0
  %10978 = vmatprep.subr.bf16.mxu0 0
  %10979 = vmatpush1.bf16.msra.mxu0 0
  %10980 = vmatprep.subr.bf16.mxu0 0
  %10981 = vmatpush1.bf16.msra.mxu0 0
  %10982 = vmatprep.subr.bf16.mxu0 0
  %10983 = vmatpush1.bf16.msra.mxu0 0
  %10984 = vmatprep.subr.bf16.mxu0 0
  %10985 = vmatpush1.bf16.msra.mxu0 0
  %10986 = vmatprep.subr.bf16.mxu0 0
  %10987 = vmatpush1.bf16.msra.mxu0 0
  %10988 = vmatprep.subr.bf16.mxu0 0
  %10989 = vmatpush1.bf16.msra.mxu0 0
  %10990 = vmatprep.subr.bf16.mxu0 0
  %10991 = vmatpush1.bf16.msra.mxu0 0
  %10992 = vmatprep.subr.bf16.mxu0 0
  %10993 = vmatpush1.bf16.msra.mxu0 0
  %10994 = vmatprep.subr.bf16.mxu0 0
  %10995 = vmatpush1.bf16.msra.mxu0 0
  %10996 = vmatprep.subr.bf16.mxu0 0
  %10997 = vmatpush1.bf16.msra.mxu0 0
  %10998 = vmatprep.subr.bf16.mxu0 0
  %10999 = vmatpush1.bf16.msra.mxu0 0
  %11000 = vmatprep.subr.bf16.mxu0 0
  %11001 = vmatpush1.bf16.msra.mxu0 0
  %11002 = vmatprep.subr.bf16.mxu0 0
  %11003 = vmatpush1.bf16.msra.mxu0 0
  %11004 = vmatprep.mubr.bf16.mxu0 0
  %11005 = vmatmul.mubr.bf16.gmra.mrb[0].mxu0 %v10946
  %v11006 = vpop.f32.mrb[0].mxu0
  %v11007 = vadd.f32 0.0, %v11006
  %v11008 = vpop.f32.mrb[0].mxu0
  %v11009 = vadd.f32 0.0, %v11008
  %v11010 = vpop.f32.mrb[0].mxu0
  %v11011 = vpop.f32.mrb[0].mxu0
  %11012 = vdwg.mxu0
  %11013 = vmatprep.subr.bf16.mxu0 %v10958
  %11014 = vmatpush1.bf16.msra.mxu0 %v10955
  %11015 = vmatprep.subr.bf16.mxu0 0
  %11016 = vmatpush1.bf16.msra.mxu0 0
  %11017 = vmatprep.subr.bf16.mxu0 0
  %11018 = vmatpush1.bf16.msra.mxu0 0
  %11019 = vmatprep.subr.bf16.mxu0 0
  %11020 = vmatpush1.bf16.msra.mxu0 0
  %11021 = vmatprep.subr.bf16.mxu0 0
  %11022 = vmatpush1.bf16.msra.mxu0 0
  %11023 = vmatprep.subr.bf16.mxu0 0
  %11024 = vmatpush1.bf16.msra.mxu0 0
  %11025 = vmatprep.subr.bf16.mxu0 0
  %11026 = vmatpush1.bf16.msra.mxu0 0
  %11027 = vmatprep.subr.bf16.mxu0 0
  %11028 = vmatpush1.bf16.msra.mxu0 0
  %11029 = vmatprep.subr.bf16.mxu0 0
  %11030 = vmatpush1.bf16.msra.mxu0 0
  %11031 = vmatprep.subr.bf16.mxu0 0
  %11032 = vmatpush1.bf16.msra.mxu0 0
  %11033 = vmatprep.subr.bf16.mxu0 0
  %11034 = vmatpush1.bf16.msra.mxu0 0
  %11035 = vmatprep.subr.bf16.mxu0 0
  %11036 = vmatpush1.bf16.msra.mxu0 0
  %11037 = vmatprep.subr.bf16.mxu0 0
  %11038 = vmatpush1.bf16.msra.mxu0 0
  %11039 = vmatprep.subr.bf16.mxu0 0
  %11040 = vmatpush1.bf16.msra.mxu0 0
  %11041 = vmatprep.subr.bf16.mxu0 0
  %11042 = vmatpush1.bf16.msra.mxu0 0
  %11043 = vmatprep.subr.bf16.mxu0 0
  %11044 = vmatpush1.bf16.msra.mxu0 0
  %11045 = vmatprep.mubr.bf16.mxu0 0
  %11046 = vmatmul.mubr.bf16.gmra.mrb[0].mxu0 %v10946
  %v11047 = vpop.f32.mrb[0].mxu0
  %v11048 = vadd.f32 0.0, %v11047
  %v11049 = vpop.f32.mrb[0].mxu0
  %v11050 = vadd.f32 0.0, %v11049
  %v11051 = vpop.f32.mrb[0].mxu0
  %v11052 = vpop.f32.mrb[0].mxu0
  %11053 = vdwg.mxu0
  %11054 = vmatprep.subr.bf16.mxu0 %v10964
  %11055 = vmatpush1.bf16.msra.mxu0 %v10961
  %11056 = vmatprep.subr.bf16.mxu0 0
  %11057 = vmatpush1.bf16.msra.mxu0 0
  %11058 = vmatprep.subr.bf16.mxu0 0
  %11059 = vmatpush1.bf16.msra.mxu0 0
  %11060 = vmatprep.subr.bf16.mxu0 0
  %11061 = vmatpush1.bf16.msra.mxu0 0
  %11062 = vmatprep.subr.bf16.mxu0 0
  %11063 = vmatpush1.bf16.msra.mxu0 0
  %11064 = vmatprep.subr.bf16.mxu0 0
  %11065 = vmatpush1.bf16.msra.mxu0 0
  %11066 = vmatprep.subr.bf16.mxu0 0
  %11067 = vmatpush1.bf16.msra.mxu0 0
  %11068 = vmatprep.subr.bf16.mxu0 0
  %11069 = vmatpush1.bf16.msra.mxu0 0
  %11070 = vmatprep.subr.bf16.mxu0 0
  %11071 = vmatpush1.bf16.msra.mxu0 0
  %11072 = vmatprep.subr.bf16.mxu0 0
  %11073 = vmatpush1.bf16.msra.mxu0 0
  %11074 = vmatprep.subr.bf16.mxu0 0
  %11075 = vmatpush1.bf16.msra.mxu0 0
  %11076 = vmatprep.subr.bf16.mxu0 0
  %11077 = vmatpush1.bf16.msra.mxu0 0
  %11078 = vmatprep.subr.bf16.mxu0 0
  %11079 = vmatpush1.bf16.msra.mxu0 0
  %11080 = vmatprep.subr.bf16.mxu0 0
  %11081 = vmatpush1.bf16.msra.mxu0 0
  %11082 = vmatprep.subr.bf16.mxu0 0
  %11083 = vmatpush1.bf16.msra.mxu0 0
  %11084 = vmatprep.subr.bf16.mxu0 0
  %11085 = vmatpush1.bf16.msra.mxu0 0
  %11086 = vmatprep.mubr.bf16.mxu0 0
  %11087 = vmatmul.mubr.bf16.gmra.mrb[0].mxu0 %v10946
  %v11088 = vpop.f32.mrb[0].mxu0
  %v11089 = vadd.f32 0.0, %v11088
  %v11090 = vpop.f32.mrb[0].mxu0
  %v11091 = vadd.f32 0.0, %v11090
  %v11092 = vpop.f32.mrb[0].mxu0
  %v11093 = vpop.f32.mrb[0].mxu0
  %11094 = vdwg.mxu0
  %11095 = vmatprep.subr.bf16.mxu0 %v10970
  %11096 = vmatpush1.bf16.msra.mxu0 %v10967
  %11097 = vmatprep.subr.bf16.mxu0 0
  %11098 = vmatpush1.bf16.msra.mxu0 0
  %11099 = vmatprep.subr.bf16.mxu0 0
  %11100 = vmatpush1.bf16.msra.mxu0 0
  %11101 = vmatprep.subr.bf16.mxu0 0
  %11102 = vmatpush1.bf16.msra.mxu0 0
  %11103 = vmatprep.subr.bf16.mxu0 0
  %11104 = vmatpush1.bf16.msra.mxu0 0
  %11105 = vmatprep.subr.bf16.mxu0 0
  %11106 = vmatpush1.bf16.msra.mxu0 0
  %11107 = vmatprep.subr.bf16.mxu0 0
  %11108 = vmatpush1.bf16.msra.mxu0 0
  %11109 = vmatprep.subr.bf16.mxu0 0
  %11110 = vmatpush1.bf16.msra.mxu0 0
  %11111 = vmatprep.subr.bf16.mxu0 0
  %11112 = vmatpush1.bf16.msra.mxu0 0
  %11113 = vmatprep.subr.bf16.mxu0 0
  %11114 = vmatpush1.bf16.msra.mxu0 0
  %11115 = vmatprep.subr.bf16.mxu0 0
  %11116 = vmatpush1.bf16.msra.mxu0 0
  %11117 = vmatprep.subr.bf16.mxu0 0
  %11118 = vmatpush1.bf16.msra.mxu0 0
  %11119 = vmatprep.subr.bf16.mxu0 0
  %11120 = vmatpush1.bf16.msra.mxu0 0
  %11121 = vmatprep.subr.bf16.mxu0 0
  %11122 = vmatpush1.bf16.msra.mxu0 0
  %11123 = vmatprep.subr.bf16.mxu0 0
  %11124 = vmatpush1.bf16.msra.mxu0 0
  %11125 = vmatprep.subr.bf16.mxu0 0
  %11126 = vmatpush1.bf16.msra.mxu0 0
  %11127 = vmatprep.mubr.bf16.mxu0 0
  %11128 = vmatmul.mubr.bf16.gmra.mrb[0].mxu0 %v10946
  %v11129 = vpop.f32.mrb[0].mxu0
  %v11130 = vadd.f32 0.0, %v11129
  %v11131 = vpop.f32.mrb[0].mxu0
  %v11132 = vadd.f32 0.0, %v11131
  %v11133 = vpop.f32.mrb[0].mxu0
  %v11134 = vpop.f32.mrb[0].mxu0
  %11135 = vdwg.mxu0
  %v11136 = vadd.f32 %v10911, %v11007
  %v11137 = vadd.f32 %v10912, %v11009
  %v11138 = vadd.f32 %v10913, %v11048
  %v11139 = vadd.f32 %v10914, %v11050
  %v11140 = vadd.f32 %v10915, %v11089
  %v11141 = vadd.f32 %v10916, %v11091
  %v11142 = vadd.f32 %v10917, %v11130
  %v11143 = vadd.f32 %v10918, %v11132
  %11144 = vrot.lane.b32.xlu0 %v9560, 29
  %v11145 = vpop.permute.xlu0 %11144
  %11146 = vrot.lane.b32.xlu0 %v9561, 29
  %v11147 = vpop.permute.xlu0 %11146
  %11148 = vrot.lane.b32.xlu0 %v9562, 29
  %v11149 = vpop.permute.xlu0 %11148
  %11150 = vrot.lane.b32.xlu0 %v9563, 29
  %v11151 = vpop.permute.xlu0 %11150
  %11152 = vrot.lane.b32.xlu0 %v9564, 29
  %v11153 = vpop.permute.xlu0 %11152
  %11154 = vrot.lane.b32.xlu0 %v9565, 29
  %v11155 = vpop.permute.xlu0 %11154
  %11156 = vrot.lane.b32.xlu0 %v9566, 29
  %v11157 = vpop.permute.xlu0 %11156
  %11158 = vrot.lane.b32.xlu0 %v9567, 29
  %v11159 = vpop.permute.xlu0 %11158
  %11160 = vrot.lane.b32.xlu0 %v9568, 29
  %v11161 = vpop.permute.xlu0 %11160
  %v11162 = vsel %vm4909, %v11145, %v11147
  %v11163 = vsel %vm4909, %v11147, %v11149
  %v11164 = vsel %vm4909, %v11149, %v11151
  %v11165 = vsel %vm4909, %v11151, %v11153
  %v11166 = vsel %vm4909, %v11153, %v11155
  %v11167 = vsel %vm4909, %v11155, %v11157
  %v11168 = vsel %vm4909, %v11157, %v11159
  %v11169 = vsel %vm4909, %v11159, %v11161
  %v11171 = vsel %vm161, %v6375, 0
  %v11174 = vsel %vm165, %v11162, 0
  %v11177 = vsel %vm165, %v11163, 0
  %v11180 = vsel %vm165, %v11164, 0
  %v11183 = vsel %vm165, %v11165, 0
  %v11186 = vsel %vm165, %v11166, 0
  %v11189 = vsel %vm165, %v11167, 0
  %v11192 = vsel %vm165, %v11168, 0
  %v11195 = vsel %vm165, %v11169, 0
  %11197 = vmatprep.subr.bf16.mxu0 %v11177
  %11198 = vmatpush1.bf16.msra.mxu0 %v11174
  %11199 = vmatprep.subr.bf16.mxu0 0
  %11200 = vmatpush1.bf16.msra.mxu0 0
  %11201 = vmatprep.subr.bf16.mxu0 0
  %11202 = vmatpush1.bf16.msra.mxu0 0
  %11203 = vmatprep.subr.bf16.mxu0 0
  %11204 = vmatpush1.bf16.msra.mxu0 0
  %11205 = vmatprep.subr.bf16.mxu0 0
  %11206 = vmatpush1.bf16.msra.mxu0 0
  %11207 = vmatprep.subr.bf16.mxu0 0
  %11208 = vmatpush1.bf16.msra.mxu0 0
  %11209 = vmatprep.subr.bf16.mxu0 0
  %11210 = vmatpush1.bf16.msra.mxu0 0
  %11211 = vmatprep.subr.bf16.mxu0 0
  %11212 = vmatpush1.bf16.msra.mxu0 0
  %11213 = vmatprep.subr.bf16.mxu0 0
  %11214 = vmatpush1.bf16.msra.mxu0 0
  %11215 = vmatprep.subr.bf16.mxu0 0
  %11216 = vmatpush1.bf16.msra.mxu0 0
  %11217 = vmatprep.subr.bf16.mxu0 0
  %11218 = vmatpush1.bf16.msra.mxu0 0
  %11219 = vmatprep.subr.bf16.mxu0 0
  %11220 = vmatpush1.bf16.msra.mxu0 0
  %11221 = vmatprep.subr.bf16.mxu0 0
  %11222 = vmatpush1.bf16.msra.mxu0 0
  %11223 = vmatprep.subr.bf16.mxu0 0
  %11224 = vmatpush1.bf16.msra.mxu0 0
  %11225 = vmatprep.subr.bf16.mxu0 0
  %11226 = vmatpush1.bf16.msra.mxu0 0
  %11227 = vmatprep.subr.bf16.mxu0 0
  %11228 = vmatpush1.bf16.msra.mxu0 0
  %11229 = vmatprep.mubr.bf16.mxu0 0
  %11230 = vmatmul.mubr.bf16.gmra.mrb[0].mxu0 %v11171
  %v11231 = vpop.f32.mrb[0].mxu0
  %v11232 = vadd.f32 0.0, %v11231
  %v11233 = vpop.f32.mrb[0].mxu0
  %v11234 = vadd.f32 0.0, %v11233
  %v11235 = vpop.f32.mrb[0].mxu0
  %v11236 = vpop.f32.mrb[0].mxu0
  %11237 = vdwg.mxu0
  %11238 = vmatprep.subr.bf16.mxu0 %v11183
  %11239 = vmatpush1.bf16.msra.mxu0 %v11180
  %11240 = vmatprep.subr.bf16.mxu0 0
  %11241 = vmatpush1.bf16.msra.mxu0 0
  %11242 = vmatprep.subr.bf16.mxu0 0
  %11243 = vmatpush1.bf16.msra.mxu0 0
  %11244 = vmatprep.subr.bf16.mxu0 0
  %11245 = vmatpush1.bf16.msra.mxu0 0
  %11246 = vmatprep.subr.bf16.mxu0 0
  %11247 = vmatpush1.bf16.msra.mxu0 0
  %11248 = vmatprep.subr.bf16.mxu0 0
  %11249 = vmatpush1.bf16.msra.mxu0 0
  %11250 = vmatprep.subr.bf16.mxu0 0
  %11251 = vmatpush1.bf16.msra.mxu0 0
  %11252 = vmatprep.subr.bf16.mxu0 0
  %11253 = vmatpush1.bf16.msra.mxu0 0
  %11254 = vmatprep.subr.bf16.mxu0 0
  %11255 = vmatpush1.bf16.msra.mxu0 0
  %11256 = vmatprep.subr.bf16.mxu0 0
  %11257 = vmatpush1.bf16.msra.mxu0 0
  %11258 = vmatprep.subr.bf16.mxu0 0
  %11259 = vmatpush1.bf16.msra.mxu0 0
  %11260 = vmatprep.subr.bf16.mxu0 0
  %11261 = vmatpush1.bf16.msra.mxu0 0
  %11262 = vmatprep.subr.bf16.mxu0 0
  %11263 = vmatpush1.bf16.msra.mxu0 0
  %11264 = vmatprep.subr.bf16.mxu0 0
  %11265 = vmatpush1.bf16.msra.mxu0 0
  %11266 = vmatprep.subr.bf16.mxu0 0
  %11267 = vmatpush1.bf16.msra.mxu0 0
  %11268 = vmatprep.subr.bf16.mxu0 0
  %11269 = vmatpush1.bf16.msra.mxu0 0
  %11270 = vmatprep.mubr.bf16.mxu0 0
  %11271 = vmatmul.mubr.bf16.gmra.mrb[0].mxu0 %v11171
  %v11272 = vpop.f32.mrb[0].mxu0
  %v11273 = vadd.f32 0.0, %v11272
  %v11274 = vpop.f32.mrb[0].mxu0
  %v11275 = vadd.f32 0.0, %v11274
  %v11276 = vpop.f32.mrb[0].mxu0
  %v11277 = vpop.f32.mrb[0].mxu0
  %11278 = vdwg.mxu0
  %11279 = vmatprep.subr.bf16.mxu0 %v11189
  %11280 = vmatpush1.bf16.msra.mxu0 %v11186
  %11281 = vmatprep.subr.bf16.mxu0 0
  %11282 = vmatpush1.bf16.msra.mxu0 0
  %11283 = vmatprep.subr.bf16.mxu0 0
  %11284 = vmatpush1.bf16.msra.mxu0 0
  %11285 = vmatprep.subr.bf16.mxu0 0
  %11286 = vmatpush1.bf16.msra.mxu0 0
  %11287 = vmatprep.subr.bf16.mxu0 0
  %11288 = vmatpush1.bf16.msra.mxu0 0
  %11289 = vmatprep.subr.bf16.mxu0 0
  %11290 = vmatpush1.bf16.msra.mxu0 0
  %11291 = vmatprep.subr.bf16.mxu0 0
  %11292 = vmatpush1.bf16.msra.mxu0 0
  %11293 = vmatprep.subr.bf16.mxu0 0
  %11294 = vmatpush1.bf16.msra.mxu0 0
  %11295 = vmatprep.subr.bf16.mxu0 0
  %11296 = vmatpush1.bf16.msra.mxu0 0
  %11297 = vmatprep.subr.bf16.mxu0 0
  %11298 = vmatpush1.bf16.msra.mxu0 0
  %11299 = vmatprep.subr.bf16.mxu0 0
  %11300 = vmatpush1.bf16.msra.mxu0 0
  %11301 = vmatprep.subr.bf16.mxu0 0
  %11302 = vmatpush1.bf16.msra.mxu0 0
  %11303 = vmatprep.subr.bf16.mxu0 0
  %11304 = vmatpush1.bf16.msra.mxu0 0
  %11305 = vmatprep.subr.bf16.mxu0 0
  %11306 = vmatpush1.bf16.msra.mxu0 0
  %11307 = vmatprep.subr.bf16.mxu0 0
  %11308 = vmatpush1.bf16.msra.mxu0 0
  %11309 = vmatprep.subr.bf16.mxu0 0
  %11310 = vmatpush1.bf16.msra.mxu0 0
  %11311 = vmatprep.mubr.bf16.mxu0 0
  %11312 = vmatmul.mubr.bf16.gmra.mrb[0].mxu0 %v11171
  %v11313 = vpop.f32.mrb[0].mxu0
  %v11314 = vadd.f32 0.0, %v11313
  %v11315 = vpop.f32.mrb[0].mxu0
  %v11316 = vadd.f32 0.0, %v11315
  %v11317 = vpop.f32.mrb[0].mxu0
  %v11318 = vpop.f32.mrb[0].mxu0
  %11319 = vdwg.mxu0
  %11320 = vmatprep.subr.bf16.mxu0 %v11195
  %11321 = vmatpush1.bf16.msra.mxu0 %v11192
  %11322 = vmatprep.subr.bf16.mxu0 0
  %11323 = vmatpush1.bf16.msra.mxu0 0
  %11324 = vmatprep.subr.bf16.mxu0 0
  %11325 = vmatpush1.bf16.msra.mxu0 0
  %11326 = vmatprep.subr.bf16.mxu0 0
  %11327 = vmatpush1.bf16.msra.mxu0 0
  %11328 = vmatprep.subr.bf16.mxu0 0
  %11329 = vmatpush1.bf16.msra.mxu0 0
  %11330 = vmatprep.subr.bf16.mxu0 0
  %11331 = vmatpush1.bf16.msra.mxu0 0
  %11332 = vmatprep.subr.bf16.mxu0 0
  %11333 = vmatpush1.bf16.msra.mxu0 0
  %11334 = vmatprep.subr.bf16.mxu0 0
  %11335 = vmatpush1.bf16.msra.mxu0 0
  %11336 = vmatprep.subr.bf16.mxu0 0
  %11337 = vmatpush1.bf16.msra.mxu0 0
  %11338 = vmatprep.subr.bf16.mxu0 0
  %11339 = vmatpush1.bf16.msra.mxu0 0
  %11340 = vmatprep.subr.bf16.mxu0 0
  %11341 = vmatpush1.bf16.msra.mxu0 0
  %11342 = vmatprep.subr.bf16.mxu0 0
  %11343 = vmatpush1.bf16.msra.mxu0 0
  %11344 = vmatprep.subr.bf16.mxu0 0
  %11345 = vmatpush1.bf16.msra.mxu0 0
  %11346 = vmatprep.subr.bf16.mxu0 0
  %11347 = vmatpush1.bf16.msra.mxu0 0
  %11348 = vmatprep.subr.bf16.mxu0 0
  %11349 = vmatpush1.bf16.msra.mxu0 0
  %11350 = vmatprep.subr.bf16.mxu0 0
  %11351 = vmatpush1.bf16.msra.mxu0 0
  %11352 = vmatprep.mubr.bf16.mxu0 0
  %11353 = vmatmul.mubr.bf16.gmra.mrb[0].mxu0 %v11171
  %v11354 = vpop.f32.mrb[0].mxu0
  %v11355 = vadd.f32 0.0, %v11354
  %v11356 = vpop.f32.mrb[0].mxu0
  %v11357 = vadd.f32 0.0, %v11356
  %v11358 = vpop.f32.mrb[0].mxu0
  %v11359 = vpop.f32.mrb[0].mxu0
  %11360 = vdwg.mxu0
  %v11361 = vadd.f32 %v11136, %v11232
  %v11362 = vadd.f32 %v11137, %v11234
  %v11363 = vadd.f32 %v11138, %v11273
  %v11364 = vadd.f32 %v11139, %v11275
  %v11365 = vadd.f32 %v11140, %v11314
  %v11366 = vadd.f32 %v11141, %v11316
  %v11367 = vadd.f32 %v11142, %v11355
  %v11368 = vadd.f32 %v11143, %v11357
  %11369 = vrot.lane.b32.xlu0 %v9560, 28
  %v11370 = vpop.permute.xlu0 %11369
  %11371 = vrot.lane.b32.xlu0 %v9561, 28
  %v11372 = vpop.permute.xlu0 %11371
  %11373 = vrot.lane.b32.xlu0 %v9562, 28
  %v11374 = vpop.permute.xlu0 %11373
  %11375 = vrot.lane.b32.xlu0 %v9563, 28
  %v11376 = vpop.permute.xlu0 %11375
  %11377 = vrot.lane.b32.xlu0 %v9564, 28
  %v11378 = vpop.permute.xlu0 %11377
  %11379 = vrot.lane.b32.xlu0 %v9565, 28
  %v11380 = vpop.permute.xlu0 %11379
  %11381 = vrot.lane.b32.xlu0 %v9566, 28
  %v11382 = vpop.permute.xlu0 %11381
  %11383 = vrot.lane.b32.xlu0 %v9567, 28
  %v11384 = vpop.permute.xlu0 %11383
  %11385 = vrot.lane.b32.xlu0 %v9568, 28
  %v11386 = vpop.permute.xlu0 %11385
  %v11387 = vsel %vm5135, %v11370, %v11372
  %v11388 = vsel %vm5135, %v11372, %v11374
  %v11389 = vsel %vm5135, %v11374, %v11376
  %v11390 = vsel %vm5135, %v11376, %v11378
  %v11391 = vsel %vm5135, %v11378, %v11380
  %v11392 = vsel %vm5135, %v11380, %v11382
  %v11393 = vsel %vm5135, %v11382, %v11384
  %v11394 = vsel %vm5135, %v11384, %v11386
  %v11396 = vsel %vm161, %v6376, 0
  %v11399 = vsel %vm165, %v11387, 0
  %v11402 = vsel %vm165, %v11388, 0
  %v11405 = vsel %vm165, %v11389, 0
  %v11408 = vsel %vm165, %v11390, 0
  %v11411 = vsel %vm165, %v11391, 0
  %v11414 = vsel %vm165, %v11392, 0
  %v11417 = vsel %vm165, %v11393, 0
  %v11420 = vsel %vm165, %v11394, 0
  %11422 = vmatprep.subr.bf16.mxu0 %v11402
  %11423 = vmatpush1.bf16.msra.mxu0 %v11399
  %11424 = vmatprep.subr.bf16.mxu0 0
  %11425 = vmatpush1.bf16.msra.mxu0 0
  %11426 = vmatprep.subr.bf16.mxu0 0
  %11427 = vmatpush1.bf16.msra.mxu0 0
  %11428 = vmatprep.subr.bf16.mxu0 0
  %11429 = vmatpush1.bf16.msra.mxu0 0
  %11430 = vmatprep.subr.bf16.mxu0 0
  %11431 = vmatpush1.bf16.msra.mxu0 0
  %11432 = vmatprep.subr.bf16.mxu0 0
  %11433 = vmatpush1.bf16.msra.mxu0 0
  %11434 = vmatprep.subr.bf16.mxu0 0
  %11435 = vmatpush1.bf16.msra.mxu0 0
  %11436 = vmatprep.subr.bf16.mxu0 0
  %11437 = vmatpush1.bf16.msra.mxu0 0
  %11438 = vmatprep.subr.bf16.mxu0 0
  %11439 = vmatpush1.bf16.msra.mxu0 0
  %11440 = vmatprep.subr.bf16.mxu0 0
  %11441 = vmatpush1.bf16.msra.mxu0 0
  %11442 = vmatprep.subr.bf16.mxu0 0
  %11443 = vmatpush1.bf16.msra.mxu0 0
  %11444 = vmatprep.subr.bf16.mxu0 0
  %11445 = vmatpush1.bf16.msra.mxu0 0
  %11446 = vmatprep.subr.bf16.mxu0 0
  %11447 = vmatpush1.bf16.msra.mxu0 0
  %11448 = vmatprep.subr.bf16.mxu0 0
  %11449 = vmatpush1.bf16.msra.mxu0 0
  %11450 = vmatprep.subr.bf16.mxu0 0
  %11451 = vmatpush1.bf16.msra.mxu0 0
  %11452 = vmatprep.subr.bf16.mxu0 0
  %11453 = vmatpush1.bf16.msra.mxu0 0
  %11454 = vmatprep.mubr.bf16.mxu0 0
  %11455 = vmatmul.mubr.bf16.gmra.mrb[0].mxu0 %v11396
  %v11456 = vpop.f32.mrb[0].mxu0
  %v11457 = vadd.f32 0.0, %v11456
  %v11458 = vpop.f32.mrb[0].mxu0
  %v11459 = vadd.f32 0.0, %v11458
  %v11460 = vpop.f32.mrb[0].mxu0
  %v11461 = vpop.f32.mrb[0].mxu0
  %11462 = vdwg.mxu0
  %11463 = vmatprep.subr.bf16.mxu0 %v11408
  %11464 = vmatpush1.bf16.msra.mxu0 %v11405
  %11465 = vmatprep.subr.bf16.mxu0 0
  %11466 = vmatpush1.bf16.msra.mxu0 0
  %11467 = vmatprep.subr.bf16.mxu0 0
  %11468 = vmatpush1.bf16.msra.mxu0 0
  %11469 = vmatprep.subr.bf16.mxu0 0
  %11470 = vmatpush1.bf16.msra.mxu0 0
  %11471 = vmatprep.subr.bf16.mxu0 0
  %11472 = vmatpush1.bf16.msra.mxu0 0
  %11473 = vmatprep.subr.bf16.mxu0 0
  %11474 = vmatpush1.bf16.msra.mxu0 0
  %11475 = vmatprep.subr.bf16.mxu0 0
  %11476 = vmatpush1.bf16.msra.mxu0 0
  %11477 = vmatprep.subr.bf16.mxu0 0
  %11478 = vmatpush1.bf16.msra.mxu0 0
  %11479 = vmatprep.subr.bf16.mxu0 0
  %11480 = vmatpush1.bf16.msra.mxu0 0
  %11481 = vmatprep.subr.bf16.mxu0 0
  %11482 = vmatpush1.bf16.msra.mxu0 0
  %11483 = vmatprep.subr.bf16.mxu0 0
  %11484 = vmatpush1.bf16.msra.mxu0 0
  %11485 = vmatprep.subr.bf16.mxu0 0
  %11486 = vmatpush1.bf16.msra.mxu0 0
  %11487 = vmatprep.subr.bf16.mxu0 0
  %11488 = vmatpush1.bf16.msra.mxu0 0
  %11489 = vmatprep.subr.bf16.mxu0 0
  %11490 = vmatpush1.bf16.msra.mxu0 0
  %11491 = vmatprep.subr.bf16.mxu0 0
  %11492 = vmatpush1.bf16.msra.mxu0 0
  %11493 = vmatprep.subr.bf16.mxu0 0
  %11494 = vmatpush1.bf16.msra.mxu0 0
  %11495 = vmatprep.mubr.bf16.mxu0 0
  %11496 = vmatmul.mubr.bf16.gmra.mrb[0].mxu0 %v11396
  %v11497 = vpop.f32.mrb[0].mxu0
  %v11498 = vadd.f32 0.0, %v11497
  %v11499 = vpop.f32.mrb[0].mxu0
  %v11500 = vadd.f32 0.0, %v11499
  %v11501 = vpop.f32.mrb[0].mxu0
  %v11502 = vpop.f32.mrb[0].mxu0
  %11503 = vdwg.mxu0
  %11504 = vmatprep.subr.bf16.mxu0 %v11414
  %11505 = vmatpush1.bf16.msra.mxu0 %v11411
  %11506 = vmatprep.subr.bf16.mxu0 0
  %11507 = vmatpush1.bf16.msra.mxu0 0
  %11508 = vmatprep.subr.bf16.mxu0 0
  %11509 = vmatpush1.bf16.msra.mxu0 0
  %11510 = vmatprep.subr.bf16.mxu0 0
  %11511 = vmatpush1.bf16.msra.mxu0 0
  %11512 = vmatprep.subr.bf16.mxu0 0
  %11513 = vmatpush1.bf16.msra.mxu0 0
  %11514 = vmatprep.subr.bf16.mxu0 0
  %11515 = vmatpush1.bf16.msra.mxu0 0
  %11516 = vmatprep.subr.bf16.mxu0 0
  %11517 = vmatpush1.bf16.msra.mxu0 0
  %11518 = vmatprep.subr.bf16.mxu0 0
  %11519 = vmatpush1.bf16.msra.mxu0 0
  %11520 = vmatprep.subr.bf16.mxu0 0
  %11521 = vmatpush1.bf16.msra.mxu0 0
  %11522 = vmatprep.subr.bf16.mxu0 0
  %11523 = vmatpush1.bf16.msra.mxu0 0
  %11524 = vmatprep.subr.bf16.mxu0 0
  %11525 = vmatpush1.bf16.msra.mxu0 0
  %11526 = vmatprep.subr.bf16.mxu0 0
  %11527 = vmatpush1.bf16.msra.mxu0 0
  %11528 = vmatprep.subr.bf16.mxu0 0
  %11529 = vmatpush1.bf16.msra.mxu0 0
  %11530 = vmatprep.subr.bf16.mxu0 0
  %11531 = vmatpush1.bf16.msra.mxu0 0
  %11532 = vmatprep.subr.bf16.mxu0 0
  %11533 = vmatpush1.bf16.msra.mxu0 0
  %11534 = vmatprep.subr.bf16.mxu0 0
  %11535 = vmatpush1.bf16.msra.mxu0 0
  %11536 = vmatprep.mubr.bf16.mxu0 0
  %11537 = vmatmul.mubr.bf16.gmra.mrb[0].mxu0 %v11396
  %v11538 = vpop.f32.mrb[0].mxu0
  %v11539 = vadd.f32 0.0, %v11538
  %v11540 = vpop.f32.mrb[0].mxu0
  %v11541 = vadd.f32 0.0, %v11540
  %v11542 = vpop.f32.mrb[0].mxu0
  %v11543 = vpop.f32.mrb[0].mxu0
  %11544 = vdwg.mxu0
  %11545 = vmatprep.subr.bf16.mxu0 %v11420
  %11546 = vmatpush1.bf16.msra.mxu0 %v11417
  %11547 = vmatprep.subr.bf16.mxu0 0
  %11548 = vmatpush1.bf16.msra.mxu0 0
  %11549 = vmatprep.subr.bf16.mxu0 0
  %11550 = vmatpush1.bf16.msra.mxu0 0
  %11551 = vmatprep.subr.bf16.mxu0 0
  %11552 = vmatpush1.bf16.msra.mxu0 0
  %11553 = vmatprep.subr.bf16.mxu0 0
  %11554 = vmatpush1.bf16.msra.mxu0 0
  %11555 = vmatprep.subr.bf16.mxu0 0
  %11556 = vmatpush1.bf16.msra.mxu0 0
  %11557 = vmatprep.subr.bf16.mxu0 0
  %11558 = vmatpush1.bf16.msra.mxu0 0
  %11559 = vmatprep.subr.bf16.mxu0 0
  %11560 = vmatpush1.bf16.msra.mxu0 0
  %11561 = vmatprep.subr.bf16.mxu0 0
  %11562 = vmatpush1.bf16.msra.mxu0 0
  %11563 = vmatprep.subr.bf16.mxu0 0
  %11564 = vmatpush1.bf16.msra.mxu0 0
  %11565 = vmatprep.subr.bf16.mxu0 0
  %11566 = vmatpush1.bf16.msra.mxu0 0
  %11567 = vmatprep.subr.bf16.mxu0 0
  %11568 = vmatpush1.bf16.msra.mxu0 0
  %11569 = vmatprep.subr.bf16.mxu0 0
  %11570 = vmatpush1.bf16.msra.mxu0 0
  %11571 = vmatprep.subr.bf16.mxu0 0
  %11572 = vmatpush1.bf16.msra.mxu0 0
  %11573 = vmatprep.subr.bf16.mxu0 0
  %11574 = vmatpush1.bf16.msra.mxu0 0
  %11575 = vmatprep.subr.bf16.mxu0 0
  %11576 = vmatpush1.bf16.msra.mxu0 0
  %11577 = vmatprep.mubr.bf16.mxu0 0
  %11578 = vmatmul.mubr.bf16.gmra.mrb[0].mxu0 %v11396
  %v11579 = vpop.f32.mrb[0].mxu0
  %v11580 = vadd.f32 0.0, %v11579
  %v11581 = vpop.f32.mrb[0].mxu0
  %v11582 = vadd.f32 0.0, %v11581
  %v11583 = vpop.f32.mrb[0].mxu0
  %v11584 = vpop.f32.mrb[0].mxu0
  %11585 = vdwg.mxu0
  %v11586 = vadd.f32 %v11361, %v11457
  %v11587 = vadd.f32 %v11362, %v11459
  %v11588 = vadd.f32 %v11363, %v11498
  %v11589 = vadd.f32 %v11364, %v11500
  %v11590 = vadd.f32 %v11365, %v11539
  %v11591 = vadd.f32 %v11366, %v11541
  %v11592 = vadd.f32 %v11367, %v11580
  %v11593 = vadd.f32 %v11368, %v11582
  %11594 = vrot.lane.b32.xlu0 %v9560, 27
  %v11595 = vpop.permute.xlu0 %11594
  %11596 = vrot.lane.b32.xlu0 %v9561, 27
  %v11597 = vpop.permute.xlu0 %11596
  %11598 = vrot.lane.b32.xlu0 %v9562, 27
  %v11599 = vpop.permute.xlu0 %11598
  %11600 = vrot.lane.b32.xlu0 %v9563, 27
  %v11601 = vpop.permute.xlu0 %11600
  %11602 = vrot.lane.b32.xlu0 %v9564, 27
  %v11603 = vpop.permute.xlu0 %11602
  %11604 = vrot.lane.b32.xlu0 %v9565, 27
  %v11605 = vpop.permute.xlu0 %11604
  %11606 = vrot.lane.b32.xlu0 %v9566, 27
  %v11607 = vpop.permute.xlu0 %11606
  %11608 = vrot.lane.b32.xlu0 %v9567, 27
  %v11609 = vpop.permute.xlu0 %11608
  %11610 = vrot.lane.b32.xlu0 %v9568, 27
  %v11611 = vpop.permute.xlu0 %11610
  %v11612 = vsel %vm5361, %v11595, %v11597
  %v11613 = vsel %vm5361, %v11597, %v11599
  %v11614 = vsel %vm5361, %v11599, %v11601
  %v11615 = vsel %vm5361, %v11601, %v11603
  %v11616 = vsel %vm5361, %v11603, %v11605
  %v11617 = vsel %vm5361, %v11605, %v11607
  %v11618 = vsel %vm5361, %v11607, %v11609
  %v11619 = vsel %vm5361, %v11609, %v11611
  %v11621 = vsel %vm161, %v6377, 0
  %v11624 = vsel %vm165, %v11612, 0
  %v11627 = vsel %vm165, %v11613, 0
  %v11630 = vsel %vm165, %v11614, 0
  %v11633 = vsel %vm165, %v11615, 0
  %v11636 = vsel %vm165, %v11616, 0
  %v11639 = vsel %vm165, %v11617, 0
  %v11642 = vsel %vm165, %v11618, 0
  %v11645 = vsel %vm165, %v11619, 0
  %11647 = vmatprep.subr.bf16.mxu0 %v11627
  %11648 = vmatpush1.bf16.msra.mxu0 %v11624
  %11649 = vmatprep.subr.bf16.mxu0 0
  %11650 = vmatpush1.bf16.msra.mxu0 0
  %11651 = vmatprep.subr.bf16.mxu0 0
  %11652 = vmatpush1.bf16.msra.mxu0 0
  %11653 = vmatprep.subr.bf16.mxu0 0
  %11654 = vmatpush1.bf16.msra.mxu0 0
  %11655 = vmatprep.subr.bf16.mxu0 0
  %11656 = vmatpush1.bf16.msra.mxu0 0
  %11657 = vmatprep.subr.bf16.mxu0 0
  %11658 = vmatpush1.bf16.msra.mxu0 0
  %11659 = vmatprep.subr.bf16.mxu0 0
  %11660 = vmatpush1.bf16.msra.mxu0 0
  %11661 = vmatprep.subr.bf16.mxu0 0
  %11662 = vmatpush1.bf16.msra.mxu0 0
  %11663 = vmatprep.subr.bf16.mxu0 0
  %11664 = vmatpush1.bf16.msra.mxu0 0
  %11665 = vmatprep.subr.bf16.mxu0 0
  %11666 = vmatpush1.bf16.msra.mxu0 0
  %11667 = vmatprep.subr.bf16.mxu0 0
  %11668 = vmatpush1.bf16.msra.mxu0 0
  %11669 = vmatprep.subr.bf16.mxu0 0
  %11670 = vmatpush1.bf16.msra.mxu0 0
  %11671 = vmatprep.subr.bf16.mxu0 0
  %11672 = vmatpush1.bf16.msra.mxu0 0
  %11673 = vmatprep.subr.bf16.mxu0 0
  %11674 = vmatpush1.bf16.msra.mxu0 0
  %11675 = vmatprep.subr.bf16.mxu0 0
  %11676 = vmatpush1.bf16.msra.mxu0 0
  %11677 = vmatprep.subr.bf16.mxu0 0
  %11678 = vmatpush1.bf16.msra.mxu0 0
  %11679 = vmatprep.mubr.bf16.mxu0 0
  %11680 = vmatmul.mubr.bf16.gmra.mrb[0].mxu0 %v11621
  %v11681 = vpop.f32.mrb[0].mxu0
  %v11682 = vadd.f32 0.0, %v11681
  %v11683 = vpop.f32.mrb[0].mxu0
  %v11684 = vadd.f32 0.0, %v11683
  %v11685 = vpop.f32.mrb[0].mxu0
  %v11686 = vpop.f32.mrb[0].mxu0
  %11687 = vdwg.mxu0
  %11688 = vmatprep.subr.bf16.mxu0 %v11633
  %11689 = vmatpush1.bf16.msra.mxu0 %v11630
  %11690 = vmatprep.subr.bf16.mxu0 0
  %11691 = vmatpush1.bf16.msra.mxu0 0
  %11692 = vmatprep.subr.bf16.mxu0 0
  %11693 = vmatpush1.bf16.msra.mxu0 0
  %11694 = vmatprep.subr.bf16.mxu0 0
  %11695 = vmatpush1.bf16.msra.mxu0 0
  %11696 = vmatprep.subr.bf16.mxu0 0
  %11697 = vmatpush1.bf16.msra.mxu0 0
  %11698 = vmatprep.subr.bf16.mxu0 0
  %11699 = vmatpush1.bf16.msra.mxu0 0
  %11700 = vmatprep.subr.bf16.mxu0 0
  %11701 = vmatpush1.bf16.msra.mxu0 0
  %11702 = vmatprep.subr.bf16.mxu0 0
  %11703 = vmatpush1.bf16.msra.mxu0 0
  %11704 = vmatprep.subr.bf16.mxu0 0
  %11705 = vmatpush1.bf16.msra.mxu0 0
  %11706 = vmatprep.subr.bf16.mxu0 0
  %11707 = vmatpush1.bf16.msra.mxu0 0
  %11708 = vmatprep.subr.bf16.mxu0 0
  %11709 = vmatpush1.bf16.msra.mxu0 0
  %11710 = vmatprep.subr.bf16.mxu0 0
  %11711 = vmatpush1.bf16.msra.mxu0 0
  %11712 = vmatprep.subr.bf16.mxu0 0
  %11713 = vmatpush1.bf16.msra.mxu0 0
  %11714 = vmatprep.subr.bf16.mxu0 0
  %11715 = vmatpush1.bf16.msra.mxu0 0
  %11716 = vmatprep.subr.bf16.mxu0 0
  %11717 = vmatpush1.bf16.msra.mxu0 0
  %11718 = vmatprep.subr.bf16.mxu0 0
  %11719 = vmatpush1.bf16.msra.mxu0 0
  %11720 = vmatprep.mubr.bf16.mxu0 0
  %11721 = vmatmul.mubr.bf16.gmra.mrb[0].mxu0 %v11621
  %v11722 = vpop.f32.mrb[0].mxu0
  %v11723 = vadd.f32 0.0, %v11722
  %v11724 = vpop.f32.mrb[0].mxu0
  %v11725 = vadd.f32 0.0, %v11724
  %v11726 = vpop.f32.mrb[0].mxu0
  %v11727 = vpop.f32.mrb[0].mxu0
  %11728 = vdwg.mxu0
  %11729 = vmatprep.subr.bf16.mxu0 %v11639
  %11730 = vmatpush1.bf16.msra.mxu0 %v11636
  %11731 = vmatprep.subr.bf16.mxu0 0
  %11732 = vmatpush1.bf16.msra.mxu0 0
  %11733 = vmatprep.subr.bf16.mxu0 0
  %11734 = vmatpush1.bf16.msra.mxu0 0
  %11735 = vmatprep.subr.bf16.mxu0 0
  %11736 = vmatpush1.bf16.msra.mxu0 0
  %11737 = vmatprep.subr.bf16.mxu0 0
  %11738 = vmatpush1.bf16.msra.mxu0 0
  %11739 = vmatprep.subr.bf16.mxu0 0
  %11740 = vmatpush1.bf16.msra.mxu0 0
  %11741 = vmatprep.subr.bf16.mxu0 0
  %11742 = vmatpush1.bf16.msra.mxu0 0
  %11743 = vmatprep.subr.bf16.mxu0 0
  %11744 = vmatpush1.bf16.msra.mxu0 0
  %11745 = vmatprep.subr.bf16.mxu0 0
  %11746 = vmatpush1.bf16.msra.mxu0 0
  %11747 = vmatprep.subr.bf16.mxu0 0
  %11748 = vmatpush1.bf16.msra.mxu0 0
  %11749 = vmatprep.subr.bf16.mxu0 0
  %11750 = vmatpush1.bf16.msra.mxu0 0
  %11751 = vmatprep.subr.bf16.mxu0 0
  %11752 = vmatpush1.bf16.msra.mxu0 0
  %11753 = vmatprep.subr.bf16.mxu0 0
  %11754 = vmatpush1.bf16.msra.mxu0 0
  %11755 = vmatprep.subr.bf16.mxu0 0
  %11756 = vmatpush1.bf16.msra.mxu0 0
  %11757 = vmatprep.subr.bf16.mxu0 0
  %11758 = vmatpush1.bf16.msra.mxu0 0
  %11759 = vmatprep.subr.bf16.mxu0 0
  %11760 = vmatpush1.bf16.msra.mxu0 0
  %11761 = vmatprep.mubr.bf16.mxu0 0
  %11762 = vmatmul.mubr.bf16.gmra.mrb[0].mxu0 %v11621
  %v11763 = vpop.f32.mrb[0].mxu0
  %v11764 = vadd.f32 0.0, %v11763
  %v11765 = vpop.f32.mrb[0].mxu0
  %v11766 = vadd.f32 0.0, %v11765
  %v11767 = vpop.f32.mrb[0].mxu0
  %v11768 = vpop.f32.mrb[0].mxu0
  %11769 = vdwg.mxu0
  %11770 = vmatprep.subr.bf16.mxu0 %v11645
  %11771 = vmatpush1.bf16.msra.mxu0 %v11642
  %11772 = vmatprep.subr.bf16.mxu0 0
  %11773 = vmatpush1.bf16.msra.mxu0 0
  %11774 = vmatprep.subr.bf16.mxu0 0
  %11775 = vmatpush1.bf16.msra.mxu0 0
  %11776 = vmatprep.subr.bf16.mxu0 0
  %11777 = vmatpush1.bf16.msra.mxu0 0
  %11778 = vmatprep.subr.bf16.mxu0 0
  %11779 = vmatpush1.bf16.msra.mxu0 0
  %11780 = vmatprep.subr.bf16.mxu0 0
  %11781 = vmatpush1.bf16.msra.mxu0 0
  %11782 = vmatprep.subr.bf16.mxu0 0
  %11783 = vmatpush1.bf16.msra.mxu0 0
  %11784 = vmatprep.subr.bf16.mxu0 0
  %11785 = vmatpush1.bf16.msra.mxu0 0
  %11786 = vmatprep.subr.bf16.mxu0 0
  %11787 = vmatpush1.bf16.msra.mxu0 0
  %11788 = vmatprep.subr.bf16.mxu0 0
  %11789 = vmatpush1.bf16.msra.mxu0 0
  %11790 = vmatprep.subr.bf16.mxu0 0
  %11791 = vmatpush1.bf16.msra.mxu0 0
  %11792 = vmatprep.subr.bf16.mxu0 0
  %11793 = vmatpush1.bf16.msra.mxu0 0
  %11794 = vmatprep.subr.bf16.mxu0 0
  %11795 = vmatpush1.bf16.msra.mxu0 0
  %11796 = vmatprep.subr.bf16.mxu0 0
  %11797 = vmatpush1.bf16.msra.mxu0 0
  %11798 = vmatprep.subr.bf16.mxu0 0
  %11799 = vmatpush1.bf16.msra.mxu0 0
  %11800 = vmatprep.subr.bf16.mxu0 0
  %11801 = vmatpush1.bf16.msra.mxu0 0
  %11802 = vmatprep.mubr.bf16.mxu0 0
  %11803 = vmatmul.mubr.bf16.gmra.mrb[0].mxu0 %v11621
  %v11804 = vpop.f32.mrb[0].mxu0
  %v11805 = vadd.f32 0.0, %v11804
  %v11806 = vpop.f32.mrb[0].mxu0
  %v11807 = vadd.f32 0.0, %v11806
  %v11808 = vpop.f32.mrb[0].mxu0
  %v11809 = vpop.f32.mrb[0].mxu0
  %11810 = vdwg.mxu0
  %v11811 = vadd.f32 %v11586, %v11682
  %v11812 = vadd.f32 %v11587, %v11684
  %v11813 = vadd.f32 %v11588, %v11723
  %v11814 = vadd.f32 %v11589, %v11725
  %v11815 = vadd.f32 %v11590, %v11764
  %v11816 = vadd.f32 %v11591, %v11766
  %v11817 = vadd.f32 %v11592, %v11805
  %v11818 = vadd.f32 %v11593, %v11807
  %11819 = vrot.lane.b32.xlu0 %v9560, 19
  %v11820 = vpop.permute.xlu0 %11819
  %11821 = vrot.lane.b32.xlu0 %v9561, 19
  %v11822 = vpop.permute.xlu0 %11821
  %11823 = vrot.lane.b32.xlu0 %v9562, 19
  %v11824 = vpop.permute.xlu0 %11823
  %11825 = vrot.lane.b32.xlu0 %v9563, 19
  %v11826 = vpop.permute.xlu0 %11825
  %11827 = vrot.lane.b32.xlu0 %v9564, 19
  %v11828 = vpop.permute.xlu0 %11827
  %11829 = vrot.lane.b32.xlu0 %v9565, 19
  %v11830 = vpop.permute.xlu0 %11829
  %11831 = vrot.lane.b32.xlu0 %v9566, 19
  %v11832 = vpop.permute.xlu0 %11831
  %11833 = vrot.lane.b32.xlu0 %v9567, 19
  %v11834 = vpop.permute.xlu0 %11833
  %11835 = vrot.lane.b32.xlu0 %v9568, 19
  %v11836 = vpop.permute.xlu0 %11835
  %v11837 = vsel %vm5587, %v11820, %v11822
  %v11838 = vsel %vm5587, %v11822, %v11824
  %v11839 = vsel %vm5587, %v11824, %v11826
  %v11840 = vsel %vm5587, %v11826, %v11828
  %v11841 = vsel %vm5587, %v11828, %v11830
  %v11842 = vsel %vm5587, %v11830, %v11832
  %v11843 = vsel %vm5587, %v11832, %v11834
  %v11844 = vsel %vm5587, %v11834, %v11836
  %v11846 = vsel %vm161, %v6378, 0
  %v11849 = vsel %vm165, %v11837, 0
  %v11852 = vsel %vm165, %v11838, 0
  %v11855 = vsel %vm165, %v11839, 0
  %v11858 = vsel %vm165, %v11840, 0
  %v11861 = vsel %vm165, %v11841, 0
  %v11864 = vsel %vm165, %v11842, 0
  %v11867 = vsel %vm165, %v11843, 0
  %v11870 = vsel %vm165, %v11844, 0
  %11872 = vmatprep.subr.bf16.mxu0 %v11852
  %11873 = vmatpush1.bf16.msra.mxu0 %v11849
  %11874 = vmatprep.subr.bf16.mxu0 0
  %11875 = vmatpush1.bf16.msra.mxu0 0
  %11876 = vmatprep.subr.bf16.mxu0 0
  %11877 = vmatpush1.bf16.msra.mxu0 0
  %11878 = vmatprep.subr.bf16.mxu0 0
  %11879 = vmatpush1.bf16.msra.mxu0 0
  %11880 = vmatprep.subr.bf16.mxu0 0
  %11881 = vmatpush1.bf16.msra.mxu0 0
  %11882 = vmatprep.subr.bf16.mxu0 0
  %11883 = vmatpush1.bf16.msra.mxu0 0
  %11884 = vmatprep.subr.bf16.mxu0 0
  %11885 = vmatpush1.bf16.msra.mxu0 0
  %11886 = vmatprep.subr.bf16.mxu0 0
  %11887 = vmatpush1.bf16.msra.mxu0 0
  %11888 = vmatprep.subr.bf16.mxu0 0
  %11889 = vmatpush1.bf16.msra.mxu0 0
  %11890 = vmatprep.subr.bf16.mxu0 0
  %11891 = vmatpush1.bf16.msra.mxu0 0
  %11892 = vmatprep.subr.bf16.mxu0 0
  %11893 = vmatpush1.bf16.msra.mxu0 0
  %11894 = vmatprep.subr.bf16.mxu0 0
  %11895 = vmatpush1.bf16.msra.mxu0 0
  %11896 = vmatprep.subr.bf16.mxu0 0
  %11897 = vmatpush1.bf16.msra.mxu0 0
  %11898 = vmatprep.subr.bf16.mxu0 0
  %11899 = vmatpush1.bf16.msra.mxu0 0
  %11900 = vmatprep.subr.bf16.mxu0 0
  %11901 = vmatpush1.bf16.msra.mxu0 0
  %11902 = vmatprep.subr.bf16.mxu0 0
  %11903 = vmatpush1.bf16.msra.mxu0 0
  %11904 = vmatprep.mubr.bf16.mxu0 0
  %11905 = vmatmul.mubr.bf16.gmra.mrb[0].mxu0 %v11846
  %v11906 = vpop.f32.mrb[0].mxu0
  %v11907 = vadd.f32 0.0, %v11906
  %v11908 = vpop.f32.mrb[0].mxu0
  %v11909 = vadd.f32 0.0, %v11908
  %v11910 = vpop.f32.mrb[0].mxu0
  %v11911 = vpop.f32.mrb[0].mxu0
  %11912 = vdwg.mxu0
  %11913 = vmatprep.subr.bf16.mxu0 %v11858
  %11914 = vmatpush1.bf16.msra.mxu0 %v11855
  %11915 = vmatprep.subr.bf16.mxu0 0
  %11916 = vmatpush1.bf16.msra.mxu0 0
  %11917 = vmatprep.subr.bf16.mxu0 0
  %11918 = vmatpush1.bf16.msra.mxu0 0
  %11919 = vmatprep.subr.bf16.mxu0 0
  %11920 = vmatpush1.bf16.msra.mxu0 0
  %11921 = vmatprep.subr.bf16.mxu0 0
  %11922 = vmatpush1.bf16.msra.mxu0 0
  %11923 = vmatprep.subr.bf16.mxu0 0
  %11924 = vmatpush1.bf16.msra.mxu0 0
  %11925 = vmatprep.subr.bf16.mxu0 0
  %11926 = vmatpush1.bf16.msra.mxu0 0
  %11927 = vmatprep.subr.bf16.mxu0 0
  %11928 = vmatpush1.bf16.msra.mxu0 0
  %11929 = vmatprep.subr.bf16.mxu0 0
  %11930 = vmatpush1.bf16.msra.mxu0 0
  %11931 = vmatprep.subr.bf16.mxu0 0
  %11932 = vmatpush1.bf16.msra.mxu0 0
  %11933 = vmatprep.subr.bf16.mxu0 0
  %11934 = vmatpush1.bf16.msra.mxu0 0
  %11935 = vmatprep.subr.bf16.mxu0 0
  %11936 = vmatpush1.bf16.msra.mxu0 0
  %11937 = vmatprep.subr.bf16.mxu0 0
  %11938 = vmatpush1.bf16.msra.mxu0 0
  %11939 = vmatprep.subr.bf16.mxu0 0
  %11940 = vmatpush1.bf16.msra.mxu0 0
  %11941 = vmatprep.subr.bf16.mxu0 0
  %11942 = vmatpush1.bf16.msra.mxu0 0
  %11943 = vmatprep.subr.bf16.mxu0 0
  %11944 = vmatpush1.bf16.msra.mxu0 0
  %11945 = vmatprep.mubr.bf16.mxu0 0
  %11946 = vmatmul.mubr.bf16.gmra.mrb[0].mxu0 %v11846
  %v11947 = vpop.f32.mrb[0].mxu0
  %v11948 = vadd.f32 0.0, %v11947
  %v11949 = vpop.f32.mrb[0].mxu0
  %v11950 = vadd.f32 0.0, %v11949
  %v11951 = vpop.f32.mrb[0].mxu0
  %v11952 = vpop.f32.mrb[0].mxu0
  %11953 = vdwg.mxu0
  %11954 = vmatprep.subr.bf16.mxu0 %v11864
  %11955 = vmatpush1.bf16.msra.mxu0 %v11861
  %11956 = vmatprep.subr.bf16.mxu0 0
  %11957 = vmatpush1.bf16.msra.mxu0 0
  %11958 = vmatprep.subr.bf16.mxu0 0
  %11959 = vmatpush1.bf16.msra.mxu0 0
  %11960 = vmatprep.subr.bf16.mxu0 0
  %11961 = vmatpush1.bf16.msra.mxu0 0
  %11962 = vmatprep.subr.bf16.mxu0 0
  %11963 = vmatpush1.bf16.msra.mxu0 0
  %11964 = vmatprep.subr.bf16.mxu0 0
  %11965 = vmatpush1.bf16.msra.mxu0 0
  %11966 = vmatprep.subr.bf16.mxu0 0
  %11967 = vmatpush1.bf16.msra.mxu0 0
  %11968 = vmatprep.subr.bf16.mxu0 0
  %11969 = vmatpush1.bf16.msra.mxu0 0
  %11970 = vmatprep.subr.bf16.mxu0 0
  %11971 = vmatpush1.bf16.msra.mxu0 0
  %11972 = vmatprep.subr.bf16.mxu0 0
  %11973 = vmatpush1.bf16.msra.mxu0 0
  %11974 = vmatprep.subr.bf16.mxu0 0
  %11975 = vmatpush1.bf16.msra.mxu0 0
  %11976 = vmatprep.subr.bf16.mxu0 0
  %11977 = vmatpush1.bf16.msra.mxu0 0
  %11978 = vmatprep.subr.bf16.mxu0 0
  %11979 = vmatpush1.bf16.msra.mxu0 0
  %11980 = vmatprep.subr.bf16.mxu0 0
  %11981 = vmatpush1.bf16.msra.mxu0 0
  %11982 = vmatprep.subr.bf16.mxu0 0
  %11983 = vmatpush1.bf16.msra.mxu0 0
  %11984 = vmatprep.subr.bf16.mxu0 0
  %11985 = vmatpush1.bf16.msra.mxu0 0
  %11986 = vmatprep.mubr.bf16.mxu0 0
  %11987 = vmatmul.mubr.bf16.gmra.mrb[0].mxu0 %v11846
  %v11988 = vpop.f32.mrb[0].mxu0
  %v11989 = vadd.f32 0.0, %v11988
  %v11990 = vpop.f32.mrb[0].mxu0
  %v11991 = vadd.f32 0.0, %v11990
  %v11992 = vpop.f32.mrb[0].mxu0
  %v11993 = vpop.f32.mrb[0].mxu0
  %11994 = vdwg.mxu0
  %11995 = vmatprep.subr.bf16.mxu0 %v11870
  %11996 = vmatpush1.bf16.msra.mxu0 %v11867
  %11997 = vmatprep.subr.bf16.mxu0 0
  %11998 = vmatpush1.bf16.msra.mxu0 0
  %11999 = vmatprep.subr.bf16.mxu0 0
  %12000 = vmatpush1.bf16.msra.mxu0 0
  %12001 = vmatprep.subr.bf16.mxu0 0
  %12002 = vmatpush1.bf16.msra.mxu0 0
  %12003 = vmatprep.subr.bf16.mxu0 0
  %12004 = vmatpush1.bf16.msra.mxu0 0
  %12005 = vmatprep.subr.bf16.mxu0 0
  %12006 = vmatpush1.bf16.msra.mxu0 0
  %12007 = vmatprep.subr.bf16.mxu0 0
  %12008 = vmatpush1.bf16.msra.mxu0 0
  %12009 = vmatprep.subr.bf16.mxu0 0
  %12010 = vmatpush1.bf16.msra.mxu0 0
  %12011 = vmatprep.subr.bf16.mxu0 0
  %12012 = vmatpush1.bf16.msra.mxu0 0
  %12013 = vmatprep.subr.bf16.mxu0 0
  %12014 = vmatpush1.bf16.msra.mxu0 0
  %12015 = vmatprep.subr.bf16.mxu0 0
  %12016 = vmatpush1.bf16.msra.mxu0 0
  %12017 = vmatprep.subr.bf16.mxu0 0
  %12018 = vmatpush1.bf16.msra.mxu0 0
  %12019 = vmatprep.subr.bf16.mxu0 0
  %12020 = vmatpush1.bf16.msra.mxu0 0
  %12021 = vmatprep.subr.bf16.mxu0 0
  %12022 = vmatpush1.bf16.msra.mxu0 0
  %12023 = vmatprep.subr.bf16.mxu0 0
  %12024 = vmatpush1.bf16.msra.mxu0 0
  %12025 = vmatprep.subr.bf16.mxu0 0
  %12026 = vmatpush1.bf16.msra.mxu0 0
  %12027 = vmatprep.mubr.bf16.mxu0 0
  %12028 = vmatmul.mubr.bf16.gmra.mrb[0].mxu0 %v11846
  %v12029 = vpop.f32.mrb[0].mxu0
  %v12030 = vadd.f32 0.0, %v12029
  %v12031 = vpop.f32.mrb[0].mxu0
  %v12032 = vadd.f32 0.0, %v12031
  %v12033 = vpop.f32.mrb[0].mxu0
  %v12034 = vpop.f32.mrb[0].mxu0
  %12035 = vdwg.mxu0
  %v12036 = vadd.f32 %v11811, %v11907
  %v12037 = vadd.f32 %v11812, %v11909
  %v12038 = vadd.f32 %v11813, %v11948
  %v12039 = vadd.f32 %v11814, %v11950
  %v12040 = vadd.f32 %v11815, %v11989
  %v12041 = vadd.f32 %v11816, %v11991
  %v12042 = vadd.f32 %v11817, %v12030
  %v12043 = vadd.f32 %v11818, %v12032
  %12044 = vrot.lane.b32.xlu0 %v9560, 18
  %v12045 = vpop.permute.xlu0 %12044
  %12046 = vrot.lane.b32.xlu0 %v9561, 18
  %v12047 = vpop.permute.xlu0 %12046
  %12048 = vrot.lane.b32.xlu0 %v9562, 18
  %v12049 = vpop.permute.xlu0 %12048
  %12050 = vrot.lane.b32.xlu0 %v9563, 18
  %v12051 = vpop.permute.xlu0 %12050
  %12052 = vrot.lane.b32.xlu0 %v9564, 18
  %v12053 = vpop.permute.xlu0 %12052
  %12054 = vrot.lane.b32.xlu0 %v9565, 18
  %v12055 = vpop.permute.xlu0 %12054
  %12056 = vrot.lane.b32.xlu0 %v9566, 18
  %v12057 = vpop.permute.xlu0 %12056
  %12058 = vrot.lane.b32.xlu0 %v9567, 18
  %v12059 = vpop.permute.xlu0 %12058
  %12060 = vrot.lane.b32.xlu0 %v9568, 18
  %v12061 = vpop.permute.xlu0 %12060
  %v12062 = vsel %vm5813, %v12045, %v12047
  %v12063 = vsel %vm5813, %v12047, %v12049
  %v12064 = vsel %vm5813, %v12049, %v12051
  %v12065 = vsel %vm5813, %v12051, %v12053
  %v12066 = vsel %vm5813, %v12053, %v12055
  %v12067 = vsel %vm5813, %v12055, %v12057
  %v12068 = vsel %vm5813, %v12057, %v12059
  %v12069 = vsel %vm5813, %v12059, %v12061
  %v12071 = vsel %vm161, %v6379, 0
  %v12074 = vsel %vm165, %v12062, 0
  %v12077 = vsel %vm165, %v12063, 0
  %v12080 = vsel %vm165, %v12064, 0
  %v12083 = vsel %vm165, %v12065, 0
  %v12086 = vsel %vm165, %v12066, 0
  %v12089 = vsel %vm165, %v12067, 0
  %v12092 = vsel %vm165, %v12068, 0
  %v12095 = vsel %vm165, %v12069, 0
  %12097 = vmatprep.subr.bf16.mxu0 %v12077
  %12098 = vmatpush1.bf16.msra.mxu0 %v12074
  %12099 = vmatprep.subr.bf16.mxu0 0
  %12100 = vmatpush1.bf16.msra.mxu0 0
  %12101 = vmatprep.subr.bf16.mxu0 0
  %12102 = vmatpush1.bf16.msra.mxu0 0
  %12103 = vmatprep.subr.bf16.mxu0 0
  %12104 = vmatpush1.bf16.msra.mxu0 0
  %12105 = vmatprep.subr.bf16.mxu0 0
  %12106 = vmatpush1.bf16.msra.mxu0 0
  %12107 = vmatprep.subr.bf16.mxu0 0
  %12108 = vmatpush1.bf16.msra.mxu0 0
  %12109 = vmatprep.subr.bf16.mxu0 0
  %12110 = vmatpush1.bf16.msra.mxu0 0
  %12111 = vmatprep.subr.bf16.mxu0 0
  %12112 = vmatpush1.bf16.msra.mxu0 0
  %12113 = vmatprep.subr.bf16.mxu0 0
  %12114 = vmatpush1.bf16.msra.mxu0 0
  %12115 = vmatprep.subr.bf16.mxu0 0
  %12116 = vmatpush1.bf16.msra.mxu0 0
  %12117 = vmatprep.subr.bf16.mxu0 0
  %12118 = vmatpush1.bf16.msra.mxu0 0
  %12119 = vmatprep.subr.bf16.mxu0 0
  %12120 = vmatpush1.bf16.msra.mxu0 0
  %12121 = vmatprep.subr.bf16.mxu0 0
  %12122 = vmatpush1.bf16.msra.mxu0 0
  %12123 = vmatprep.subr.bf16.mxu0 0
  %12124 = vmatpush1.bf16.msra.mxu0 0
  %12125 = vmatprep.subr.bf16.mxu0 0
  %12126 = vmatpush1.bf16.msra.mxu0 0
  %12127 = vmatprep.subr.bf16.mxu0 0
  %12128 = vmatpush1.bf16.msra.mxu0 0
  %12129 = vmatprep.mubr.bf16.mxu0 0
  %12130 = vmatmul.mubr.bf16.gmra.mrb[0].mxu0 %v12071
  %v12131 = vpop.f32.mrb[0].mxu0
  %v12132 = vadd.f32 0.0, %v12131
  %v12133 = vpop.f32.mrb[0].mxu0
  %v12134 = vadd.f32 0.0, %v12133
  %v12135 = vpop.f32.mrb[0].mxu0
  %v12136 = vpop.f32.mrb[0].mxu0
  %12137 = vdwg.mxu0
  %12138 = vmatprep.subr.bf16.mxu0 %v12083
  %12139 = vmatpush1.bf16.msra.mxu0 %v12080
  %12140 = vmatprep.subr.bf16.mxu0 0
  %12141 = vmatpush1.bf16.msra.mxu0 0
  %12142 = vmatprep.subr.bf16.mxu0 0
  %12143 = vmatpush1.bf16.msra.mxu0 0
  %12144 = vmatprep.subr.bf16.mxu0 0
  %12145 = vmatpush1.bf16.msra.mxu0 0
  %12146 = vmatprep.subr.bf16.mxu0 0
  %12147 = vmatpush1.bf16.msra.mxu0 0
  %12148 = vmatprep.subr.bf16.mxu0 0
  %12149 = vmatpush1.bf16.msra.mxu0 0
  %12150 = vmatprep.subr.bf16.mxu0 0
  %12151 = vmatpush1.bf16.msra.mxu0 0
  %12152 = vmatprep.subr.bf16.mxu0 0
  %12153 = vmatpush1.bf16.msra.mxu0 0
  %12154 = vmatprep.subr.bf16.mxu0 0
  %12155 = vmatpush1.bf16.msra.mxu0 0
  %12156 = vmatprep.subr.bf16.mxu0 0
  %12157 = vmatpush1.bf16.msra.mxu0 0
  %12158 = vmatprep.subr.bf16.mxu0 0
  %12159 = vmatpush1.bf16.msra.mxu0 0
  %12160 = vmatprep.subr.bf16.mxu0 0
  %12161 = vmatpush1.bf16.msra.mxu0 0
  %12162 = vmatprep.subr.bf16.mxu0 0
  %12163 = vmatpush1.bf16.msra.mxu0 0
  %12164 = vmatprep.subr.bf16.mxu0 0
  %12165 = vmatpush1.bf16.msra.mxu0 0
  %12166 = vmatprep.subr.bf16.mxu0 0
  %12167 = vmatpush1.bf16.msra.mxu0 0
  %12168 = vmatprep.subr.bf16.mxu0 0
  %12169 = vmatpush1.bf16.msra.mxu0 0
  %12170 = vmatprep.mubr.bf16.mxu0 0
  %12171 = vmatmul.mubr.bf16.gmra.mrb[0].mxu0 %v12071
  %v12172 = vpop.f32.mrb[0].mxu0
  %v12173 = vadd.f32 0.0, %v12172
  %v12174 = vpop.f32.mrb[0].mxu0
  %v12175 = vadd.f32 0.0, %v12174
  %v12176 = vpop.f32.mrb[0].mxu0
  %v12177 = vpop.f32.mrb[0].mxu0
  %12178 = vdwg.mxu0
  %12179 = vmatprep.subr.bf16.mxu0 %v12089
  %12180 = vmatpush1.bf16.msra.mxu0 %v12086
  %12181 = vmatprep.subr.bf16.mxu0 0
  %12182 = vmatpush1.bf16.msra.mxu0 0
  %12183 = vmatprep.subr.bf16.mxu0 0
  %12184 = vmatpush1.bf16.msra.mxu0 0
  %12185 = vmatprep.subr.bf16.mxu0 0
  %12186 = vmatpush1.bf16.msra.mxu0 0
  %12187 = vmatprep.subr.bf16.mxu0 0
  %12188 = vmatpush1.bf16.msra.mxu0 0
  %12189 = vmatprep.subr.bf16.mxu0 0
  %12190 = vmatpush1.bf16.msra.mxu0 0
  %12191 = vmatprep.subr.bf16.mxu0 0
  %12192 = vmatpush1.bf16.msra.mxu0 0
  %12193 = vmatprep.subr.bf16.mxu0 0
  %12194 = vmatpush1.bf16.msra.mxu0 0
  %12195 = vmatprep.subr.bf16.mxu0 0
  %12196 = vmatpush1.bf16.msra.mxu0 0
  %12197 = vmatprep.subr.bf16.mxu0 0
  %12198 = vmatpush1.bf16.msra.mxu0 0
  %12199 = vmatprep.subr.bf16.mxu0 0
  %12200 = vmatpush1.bf16.msra.mxu0 0
  %12201 = vmatprep.subr.bf16.mxu0 0
  %12202 = vmatpush1.bf16.msra.mxu0 0
  %12203 = vmatprep.subr.bf16.mxu0 0
  %12204 = vmatpush1.bf16.msra.mxu0 0
  %12205 = vmatprep.subr.bf16.mxu0 0
  %12206 = vmatpush1.bf16.msra.mxu0 0
  %12207 = vmatprep.subr.bf16.mxu0 0
  %12208 = vmatpush1.bf16.msra.mxu0 0
  %12209 = vmatprep.subr.bf16.mxu0 0
  %12210 = vmatpush1.bf16.msra.mxu0 0
  %12211 = vmatprep.mubr.bf16.mxu0 0
  %12212 = vmatmul.mubr.bf16.gmra.mrb[0].mxu0 %v12071
  %v12213 = vpop.f32.mrb[0].mxu0
  %v12214 = vadd.f32 0.0, %v12213
  %v12215 = vpop.f32.mrb[0].mxu0
  %v12216 = vadd.f32 0.0, %v12215
  %v12217 = vpop.f32.mrb[0].mxu0
  %v12218 = vpop.f32.mrb[0].mxu0
  %12219 = vdwg.mxu0
  %12220 = vmatprep.subr.bf16.mxu0 %v12095
  %12221 = vmatpush1.bf16.msra.mxu0 %v12092
  %12222 = vmatprep.subr.bf16.mxu0 0
  %12223 = vmatpush1.bf16.msra.mxu0 0
  %12224 = vmatprep.subr.bf16.mxu0 0
  %12225 = vmatpush1.bf16.msra.mxu0 0
  %12226 = vmatprep.subr.bf16.mxu0 0
  %12227 = vmatpush1.bf16.msra.mxu0 0
  %12228 = vmatprep.subr.bf16.mxu0 0
  %12229 = vmatpush1.bf16.msra.mxu0 0
  %12230 = vmatprep.subr.bf16.mxu0 0
  %12231 = vmatpush1.bf16.msra.mxu0 0
  %12232 = vmatprep.subr.bf16.mxu0 0
  %12233 = vmatpush1.bf16.msra.mxu0 0
  %12234 = vmatprep.subr.bf16.mxu0 0
  %12235 = vmatpush1.bf16.msra.mxu0 0
  %12236 = vmatprep.subr.bf16.mxu0 0
  %12237 = vmatpush1.bf16.msra.mxu0 0
  %12238 = vmatprep.subr.bf16.mxu0 0
  %12239 = vmatpush1.bf16.msra.mxu0 0
  %12240 = vmatprep.subr.bf16.mxu0 0
  %12241 = vmatpush1.bf16.msra.mxu0 0
  %12242 = vmatprep.subr.bf16.mxu0 0
  %12243 = vmatpush1.bf16.msra.mxu0 0
  %12244 = vmatprep.subr.bf16.mxu0 0
  %12245 = vmatpush1.bf16.msra.mxu0 0
  %12246 = vmatprep.subr.bf16.mxu0 0
  %12247 = vmatpush1.bf16.msra.mxu0 0
  %12248 = vmatprep.subr.bf16.mxu0 0
  %12249 = vmatpush1.bf16.msra.mxu0 0
  %12250 = vmatprep.subr.bf16.mxu0 0
  %12251 = vmatpush1.bf16.msra.mxu0 0
  %12252 = vmatprep.mubr.bf16.mxu0 0
  %12253 = vmatmul.mubr.bf16.gmra.mrb[0].mxu0 %v12071
  %v12254 = vpop.f32.mrb[0].mxu0
  %v12255 = vadd.f32 0.0, %v12254
  %v12256 = vpop.f32.mrb[0].mxu0
  %v12257 = vadd.f32 0.0, %v12256
  %v12258 = vpop.f32.mrb[0].mxu0
  %v12259 = vpop.f32.mrb[0].mxu0
  %12260 = vdwg.mxu0
  %v12261 = vadd.f32 %v12036, %v12132
  %v12262 = vadd.f32 %v12037, %v12134
  %v12263 = vadd.f32 %v12038, %v12173
  %v12264 = vadd.f32 %v12039, %v12175
  %v12265 = vadd.f32 %v12040, %v12214
  %v12266 = vadd.f32 %v12041, %v12216
  %v12267 = vadd.f32 %v12042, %v12255
  %v12268 = vadd.f32 %v12043, %v12257
  %12269 = vrot.lane.b32.xlu0 %v9560, 17
  %v12270 = vpop.permute.xlu0 %12269
  %12271 = vrot.lane.b32.xlu0 %v9561, 17
  %v12272 = vpop.permute.xlu0 %12271
  %12273 = vrot.lane.b32.xlu0 %v9562, 17
  %v12274 = vpop.permute.xlu0 %12273
  %12275 = vrot.lane.b32.xlu0 %v9563, 17
  %v12276 = vpop.permute.xlu0 %12275
  %12277 = vrot.lane.b32.xlu0 %v9564, 17
  %v12278 = vpop.permute.xlu0 %12277
  %12279 = vrot.lane.b32.xlu0 %v9565, 17
  %v12280 = vpop.permute.xlu0 %12279
  %12281 = vrot.lane.b32.xlu0 %v9566, 17
  %v12282 = vpop.permute.xlu0 %12281
  %12283 = vrot.lane.b32.xlu0 %v9567, 17
  %v12284 = vpop.permute.xlu0 %12283
  %12285 = vrot.lane.b32.xlu0 %v9568, 17
  %v12286 = vpop.permute.xlu0 %12285
  %v12287 = vsel %vm6039, %v12270, %v12272
  %v12288 = vsel %vm6039, %v12272, %v12274
  %v12289 = vsel %vm6039, %v12274, %v12276
  %v12290 = vsel %vm6039, %v12276, %v12278
  %v12291 = vsel %vm6039, %v12278, %v12280
  %v12292 = vsel %vm6039, %v12280, %v12282
  %v12293 = vsel %vm6039, %v12282, %v12284
  %v12294 = vsel %vm6039, %v12284, %v12286
  %v12296 = vsel %vm161, %v6380, 0
  %v12299 = vsel %vm165, %v12287, 0
  %v12302 = vsel %vm165, %v12288, 0
  %v12305 = vsel %vm165, %v12289, 0
  %v12308 = vsel %vm165, %v12290, 0
  %v12311 = vsel %vm165, %v12291, 0
  %v12314 = vsel %vm165, %v12292, 0
  %v12317 = vsel %vm165, %v12293, 0
  %v12320 = vsel %vm165, %v12294, 0
  %12322 = vmatprep.subr.bf16.mxu0 %v12302
  %12323 = vmatpush1.bf16.msra.mxu0 %v12299
  %12324 = vmatprep.subr.bf16.mxu0 0
  %12325 = vmatpush1.bf16.msra.mxu0 0
  %12326 = vmatprep.subr.bf16.mxu0 0
  %12327 = vmatpush1.bf16.msra.mxu0 0
  %12328 = vmatprep.subr.bf16.mxu0 0
  %12329 = vmatpush1.bf16.msra.mxu0 0
  %12330 = vmatprep.subr.bf16.mxu0 0
  %12331 = vmatpush1.bf16.msra.mxu0 0
  %12332 = vmatprep.subr.bf16.mxu0 0
  %12333 = vmatpush1.bf16.msra.mxu0 0
  %12334 = vmatprep.subr.bf16.mxu0 0
  %12335 = vmatpush1.bf16.msra.mxu0 0
  %12336 = vmatprep.subr.bf16.mxu0 0
  %12337 = vmatpush1.bf16.msra.mxu0 0
  %12338 = vmatprep.subr.bf16.mxu0 0
  %12339 = vmatpush1.bf16.msra.mxu0 0
  %12340 = vmatprep.subr.bf16.mxu0 0
  %12341 = vmatpush1.bf16.msra.mxu0 0
  %12342 = vmatprep.subr.bf16.mxu0 0
  %12343 = vmatpush1.bf16.msra.mxu0 0
  %12344 = vmatprep.subr.bf16.mxu0 0
  %12345 = vmatpush1.bf16.msra.mxu0 0
  %12346 = vmatprep.subr.bf16.mxu0 0
  %12347 = vmatpush1.bf16.msra.mxu0 0
  %12348 = vmatprep.subr.bf16.mxu0 0
  %12349 = vmatpush1.bf16.msra.mxu0 0
  %12350 = vmatprep.subr.bf16.mxu0 0
  %12351 = vmatpush1.bf16.msra.mxu0 0
  %12352 = vmatprep.subr.bf16.mxu0 0
  %12353 = vmatpush1.bf16.msra.mxu0 0
  %12354 = vmatprep.mubr.bf16.mxu0 0
  %12355 = vmatmul.mubr.bf16.gmra.mrb[0].mxu0 %v12296
  %v12356 = vpop.f32.mrb[0].mxu0
  %v12357 = vadd.f32 0.0, %v12356
  %v12358 = vpop.f32.mrb[0].mxu0
  %v12359 = vadd.f32 0.0, %v12358
  %v12360 = vpop.f32.mrb[0].mxu0
  %v12361 = vpop.f32.mrb[0].mxu0
  %12362 = vdwg.mxu0
  %12363 = vmatprep.subr.bf16.mxu0 %v12308
  %12364 = vmatpush1.bf16.msra.mxu0 %v12305
  %12365 = vmatprep.subr.bf16.mxu0 0
  %12366 = vmatpush1.bf16.msra.mxu0 0
  %12367 = vmatprep.subr.bf16.mxu0 0
  %12368 = vmatpush1.bf16.msra.mxu0 0
  %12369 = vmatprep.subr.bf16.mxu0 0
  %12370 = vmatpush1.bf16.msra.mxu0 0
  %12371 = vmatprep.subr.bf16.mxu0 0
  %12372 = vmatpush1.bf16.msra.mxu0 0
  %12373 = vmatprep.subr.bf16.mxu0 0
  %12374 = vmatpush1.bf16.msra.mxu0 0
  %12375 = vmatprep.subr.bf16.mxu0 0
  %12376 = vmatpush1.bf16.msra.mxu0 0
  %12377 = vmatprep.subr.bf16.mxu0 0
  %12378 = vmatpush1.bf16.msra.mxu0 0
  %12379 = vmatprep.subr.bf16.mxu0 0
  %12380 = vmatpush1.bf16.msra.mxu0 0
  %12381 = vmatprep.subr.bf16.mxu0 0
  %12382 = vmatpush1.bf16.msra.mxu0 0
  %12383 = vmatprep.subr.bf16.mxu0 0
  %12384 = vmatpush1.bf16.msra.mxu0 0
  %12385 = vmatprep.subr.bf16.mxu0 0
  %12386 = vmatpush1.bf16.msra.mxu0 0
  %12387 = vmatprep.subr.bf16.mxu0 0
  %12388 = vmatpush1.bf16.msra.mxu0 0
  %12389 = vmatprep.subr.bf16.mxu0 0
  %12390 = vmatpush1.bf16.msra.mxu0 0
  %12391 = vmatprep.subr.bf16.mxu0 0
  %12392 = vmatpush1.bf16.msra.mxu0 0
  %12393 = vmatprep.subr.bf16.mxu0 0
  %12394 = vmatpush1.bf16.msra.mxu0 0
  %12395 = vmatprep.mubr.bf16.mxu0 0
  %12396 = vmatmul.mubr.bf16.gmra.mrb[0].mxu0 %v12296
  %v12397 = vpop.f32.mrb[0].mxu0
  %v12398 = vadd.f32 0.0, %v12397
  %v12399 = vpop.f32.mrb[0].mxu0
  %v12400 = vadd.f32 0.0, %v12399
  %v12401 = vpop.f32.mrb[0].mxu0
  %v12402 = vpop.f32.mrb[0].mxu0
  %12403 = vdwg.mxu0
  %12404 = vmatprep.subr.bf16.mxu0 %v12314
  %12405 = vmatpush1.bf16.msra.mxu0 %v12311
  %12406 = vmatprep.subr.bf16.mxu0 0
  %12407 = vmatpush1.bf16.msra.mxu0 0
  %12408 = vmatprep.subr.bf16.mxu0 0
  %12409 = vmatpush1.bf16.msra.mxu0 0
  %12410 = vmatprep.subr.bf16.mxu0 0
  %12411 = vmatpush1.bf16.msra.mxu0 0
  %12412 = vmatprep.subr.bf16.mxu0 0
  %12413 = vmatpush1.bf16.msra.mxu0 0
  %12414 = vmatprep.subr.bf16.mxu0 0
  %12415 = vmatpush1.bf16.msra.mxu0 0
  %12416 = vmatprep.subr.bf16.mxu0 0
  %12417 = vmatpush1.bf16.msra.mxu0 0
  %12418 = vmatprep.subr.bf16.mxu0 0
  %12419 = vmatpush1.bf16.msra.mxu0 0
  %12420 = vmatprep.subr.bf16.mxu0 0
  %12421 = vmatpush1.bf16.msra.mxu0 0
  %12422 = vmatprep.subr.bf16.mxu0 0
  %12423 = vmatpush1.bf16.msra.mxu0 0
  %12424 = vmatprep.subr.bf16.mxu0 0
  %12425 = vmatpush1.bf16.msra.mxu0 0
  %12426 = vmatprep.subr.bf16.mxu0 0
  %12427 = vmatpush1.bf16.msra.mxu0 0
  %12428 = vmatprep.subr.bf16.mxu0 0
  %12429 = vmatpush1.bf16.msra.mxu0 0
  %12430 = vmatprep.subr.bf16.mxu0 0
  %12431 = vmatpush1.bf16.msra.mxu0 0
  %12432 = vmatprep.subr.bf16.mxu0 0
  %12433 = vmatpush1.bf16.msra.mxu0 0
  %12434 = vmatprep.subr.bf16.mxu0 0
  %12435 = vmatpush1.bf16.msra.mxu0 0
  %12436 = vmatprep.mubr.bf16.mxu0 0
  %12437 = vmatmul.mubr.bf16.gmra.mrb[0].mxu0 %v12296
  %v12438 = vpop.f32.mrb[0].mxu0
  %v12439 = vadd.f32 0.0, %v12438
  %v12440 = vpop.f32.mrb[0].mxu0
  %v12441 = vadd.f32 0.0, %v12440
  %v12442 = vpop.f32.mrb[0].mxu0
  %v12443 = vpop.f32.mrb[0].mxu0
  %12444 = vdwg.mxu0
  %12445 = vmatprep.subr.bf16.mxu0 %v12320
  %12446 = vmatpush1.bf16.msra.mxu0 %v12317
  %12447 = vmatprep.subr.bf16.mxu0 0
  %12448 = vmatpush1.bf16.msra.mxu0 0
  %12449 = vmatprep.subr.bf16.mxu0 0
  %12450 = vmatpush1.bf16.msra.mxu0 0
  %12451 = vmatprep.subr.bf16.mxu0 0
  %12452 = vmatpush1.bf16.msra.mxu0 0
  %12453 = vmatprep.subr.bf16.mxu0 0
  %12454 = vmatpush1.bf16.msra.mxu0 0
  %12455 = vmatprep.subr.bf16.mxu0 0
  %12456 = vmatpush1.bf16.msra.mxu0 0
  %12457 = vmatprep.subr.bf16.mxu0 0
  %12458 = vmatpush1.bf16.msra.mxu0 0
  %12459 = vmatprep.subr.bf16.mxu0 0
  %12460 = vmatpush1.bf16.msra.mxu0 0
  %12461 = vmatprep.subr.bf16.mxu0 0
  %12462 = vmatpush1.bf16.msra.mxu0 0
  %12463 = vmatprep.subr.bf16.mxu0 0
  %12464 = vmatpush1.bf16.msra.mxu0 0
  %12465 = vmatprep.subr.bf16.mxu0 0
  %12466 = vmatpush1.bf16.msra.mxu0 0
  %12467 = vmatprep.subr.bf16.mxu0 0
  %12468 = vmatpush1.bf16.msra.mxu0 0
  %12469 = vmatprep.subr.bf16.mxu0 0
  %12470 = vmatpush1.bf16.msra.mxu0 0
  %12471 = vmatprep.subr.bf16.mxu0 0
  %12472 = vmatpush1.bf16.msra.mxu0 0
  %12473 = vmatprep.subr.bf16.mxu0 0
  %12474 = vmatpush1.bf16.msra.mxu0 0
  %12475 = vmatprep.subr.bf16.mxu0 0
  %12476 = vmatpush1.bf16.msra.mxu0 0
  %12477 = vmatprep.mubr.bf16.mxu0 0
  %12478 = vmatmul.mubr.bf16.gmra.mrb[0].mxu0 %v12296
  %v12479 = vpop.f32.mrb[0].mxu0
  %v12480 = vadd.f32 0.0, %v12479
  %v12481 = vpop.f32.mrb[0].mxu0
  %v12482 = vadd.f32 0.0, %v12481
  %v12483 = vpop.f32.mrb[0].mxu0
  %v12484 = vpop.f32.mrb[0].mxu0
  %12485 = vdwg.mxu0
  %v12486 = vadd.f32 %v12261, %v12357
  %v12487 = vadd.f32 %v12262, %v12359
  %v12488 = vadd.f32 %v12263, %v12398
  %v12489 = vadd.f32 %v12264, %v12400
  %v12490 = vadd.f32 %v12265, %v12439
  %v12491 = vadd.f32 %v12266, %v12441
  %v12492 = vadd.f32 %v12267, %v12480
  %v12493 = vadd.f32 %v12268, %v12482
  %v12494 = vld [vmem:[%s5] sm:$0xff]
  %12496 = vset.pattern.permute.xlu0 0
  %12497 = vperm.xlu0 %12496, %v12494
  %v12498 = vpop.permute.xlu0 %12497
  %v12500 = vadd.f32 %v12486, %v12498
  %v12501 = vadd.f32 %v12487, %v12498
  %v12502 = vadd.f32 %v12488, %v12498
  %v12503 = vadd.f32 %v12489, %v12498
  %v12504 = vadd.f32 %v12490, %v12498
  %v12505 = vadd.f32 %v12491, %v12498
  %v12506 = vadd.f32 %v12492, %v12498
  %v12507 = vadd.f32 %v12493, %v12498
  %v12508 = vmax.f32 %v12500, 0.0
  %v12509 = vmax.f32 %v12501, 0.0
  %v12510 = vmax.f32 %v12502, 0.0
  %v12511 = vmax.f32 %v12503, 0.0
  %v12512 = vmax.f32 %v12504, 0.0
  %v12513 = vmax.f32 %v12505, 0.0
  %v12514 = vmax.f32 %v12506, 0.0
  %v12515 = vmax.f32 %v12507, 0.0
  %v12516 = vld [vmem:[%s6] sm:$0xf]
  %v12517 = vpack.c.bf16 %v12508, %v12508
  %v12518 = vpack.c.bf16 %v12509, %v12509
  %v12519 = vpack.c.bf16 %v12510, %v12510
  %v12520 = vpack.c.bf16 %v12511, %v12511
  %v12521 = vpack.c.bf16 %v12512, %v12512
  %v12522 = vpack.c.bf16 %v12513, %v12513
  %v12523 = vpack.c.bf16 %v12514, %v12514
  %v12524 = vpack.c.bf16 %v12515, %v12515
  %v12525 = vld [vmem:[%s7] sm:$0xff]
  %12527 = vset.pattern.permute.xlu0 0
  %12528 = vperm.xlu0 %12527, %v12525
  %v12529 = vpop.permute.xlu0 %12528
  %v12532 = vsel %vm161, %v12516, 0
  %v12535 = vsel %vm165, %v12517, 0
  %v12538 = vsel %vm165, %v12518, 0
  %v12541 = vsel %vm165, %v12519, 0
  %v12544 = vsel %vm165, %v12520, 0
  %v12547 = vsel %vm165, %v12521, 0
  %v12550 = vsel %vm165, %v12522, 0
  %v12553 = vsel %vm165, %v12523, 0
  %v12556 = vsel %vm165, %v12524, 0
  %12558 = vmatprep.subr.bf16.mxu0 %v12538
  %12559 = vmatpush1.bf16.msra.mxu0 %v12535
  %12560 = vmatprep.subr.bf16.mxu0 0
  %12561 = vmatpush1.bf16.msra.mxu0 0
  %12562 = vmatprep.subr.bf16.mxu0 0
  %12563 = vmatpush1.bf16.msra.mxu0 0
  %12564 = vmatprep.subr.bf16.mxu0 0
  %12565 = vmatpush1.bf16.msra.mxu0 0
  %12566 = vmatprep.subr.bf16.mxu0 0
  %12567 = vmatpush1.bf16.msra.mxu0 0
  %12568 = vmatprep.subr.bf16.mxu0 0
  %12569 = vmatpush1.bf16.msra.mxu0 0
  %12570 = vmatprep.subr.bf16.mxu0 0
  %12571 = vmatpush1.bf16.msra.mxu0 0
  %12572 = vmatprep.subr.bf16.mxu0 0
  %12573 = vmatpush1.bf16.msra.mxu0 0
  %12574 = vmatprep.subr.bf16.mxu0 0
  %12575 = vmatpush1.bf16.msra.mxu0 0
  %12576 = vmatprep.subr.bf16.mxu0 0
  %12577 = vmatpush1.bf16.msra.mxu0 0
  %12578 = vmatprep.subr.bf16.mxu0 0
  %12579 = vmatpush1.bf16.msra.mxu0 0
  %12580 = vmatprep.subr.bf16.mxu0 0
  %12581 = vmatpush1.bf16.msra.mxu0 0
  %12582 = vmatprep.subr.bf16.mxu0 0
  %12583 = vmatpush1.bf16.msra.mxu0 0
  %12584 = vmatprep.subr.bf16.mxu0 0
  %12585 = vmatpush1.bf16.msra.mxu0 0
  %12586 = vmatprep.subr.bf16.mxu0 0
  %12587 = vmatpush1.bf16.msra.mxu0 0
  %12588 = vmatprep.subr.bf16.mxu0 0
  %12589 = vmatpush1.bf16.msra.mxu0 0
  %12590 = vmatprep.mubr.bf16.mxu0 0
  %12591 = vmatmul.mubr.bf16.gmra.mrb[0].mxu0 %v12532
  %v12592 = vpop.f32.mrb[0].mxu0
  %v12593 = vadd.f32 %v12529, %v12592
  %v12594 = vpop.f32.mrb[0].mxu0
  %v12595 = vadd.f32 %v12529, %v12594
  %v12596 = vpop.f32.mrb[0].mxu0
  %v12597 = vpop.f32.mrb[0].mxu0
  %12598 = vdwg.mxu0
  %12599 = vmatprep.subr.bf16.mxu0 %v12544
  %12600 = vmatpush1.bf16.msra.mxu0 %v12541
  %12601 = vmatprep.subr.bf16.mxu0 0
  %12602 = vmatpush1.bf16.msra.mxu0 0
  %12603 = vmatprep.subr.bf16.mxu0 0
  %12604 = vmatpush1.bf16.msra.mxu0 0
  %12605 = vmatprep.subr.bf16.mxu0 0
  %12606 = vmatpush1.bf16.msra.mxu0 0
  %12607 = vmatprep.subr.bf16.mxu0 0
  %12608 = vmatpush1.bf16.msra.mxu0 0
  %12609 = vmatprep.subr.bf16.mxu0 0
  %12610 = vmatpush1.bf16.msra.mxu0 0
  %12611 = vmatprep.subr.bf16.mxu0 0
  %12612 = vmatpush1.bf16.msra.mxu0 0
  %12613 = vmatprep.subr.bf16.mxu0 0
  %12614 = vmatpush1.bf16.msra.mxu0 0
  %12615 = vmatprep.subr.bf16.mxu0 0
  %12616 = vmatpush1.bf16.msra.mxu0 0
  %12617 = vmatprep.subr.bf16.mxu0 0
  %12618 = vmatpush1.bf16.msra.mxu0 0
  %12619 = vmatprep.subr.bf16.mxu0 0
  %12620 = vmatpush1.bf16.msra.mxu0 0
  %12621 = vmatprep.subr.bf16.mxu0 0
  %12622 = vmatpush1.bf16.msra.mxu0 0
  %12623 = vmatprep.subr.bf16.mxu0 0
  %12624 = vmatpush1.bf16.msra.mxu0 0
  %12625 = vmatprep.subr.bf16.mxu0 0
  %12626 = vmatpush1.bf16.msra.mxu0 0
  %12627 = vmatprep.subr.bf16.mxu0 0
  %12628 = vmatpush1.bf16.msra.mxu0 0
  %12629 = vmatprep.subr.bf16.mxu0 0
  %12630 = vmatpush1.bf16.msra.mxu0 0
  %12631 = vmatprep.mubr.bf16.mxu0 0
  %12632 = vmatmul.mubr.bf16.gmra.mrb[0].mxu0 %v12532
  %v12633 = vpop.f32.mrb[0].mxu0
  %v12634 = vadd.f32 %v12529, %v12633
  %v12635 = vpop.f32.mrb[0].mxu0
  %v12636 = vadd.f32 %v12529, %v12635
  %v12637 = vpop.f32.mrb[0].mxu0
  %v12638 = vpop.f32.mrb[0].mxu0
  %12639 = vdwg.mxu0
  %12640 = vmatprep.subr.bf16.mxu0 %v12550
  %12641 = vmatpush1.bf16.msra.mxu0 %v12547
  %12642 = vmatprep.subr.bf16.mxu0 0
  %12643 = vmatpush1.bf16.msra.mxu0 0
  %12644 = vmatprep.subr.bf16.mxu0 0
  %12645 = vmatpush1.bf16.msra.mxu0 0
  %12646 = vmatprep.subr.bf16.mxu0 0
  %12647 = vmatpush1.bf16.msra.mxu0 0
  %12648 = vmatprep.subr.bf16.mxu0 0
  %12649 = vmatpush1.bf16.msra.mxu0 0
  %12650 = vmatprep.subr.bf16.mxu0 0
  %12651 = vmatpush1.bf16.msra.mxu0 0
  %12652 = vmatprep.subr.bf16.mxu0 0
  %12653 = vmatpush1.bf16.msra.mxu0 0
  %12654 = vmatprep.subr.bf16.mxu0 0
  %12655 = vmatpush1.bf16.msra.mxu0 0
  %12656 = vmatprep.subr.bf16.mxu0 0
  %12657 = vmatpush1.bf16.msra.mxu0 0
  %12658 = vmatprep.subr.bf16.mxu0 0
  %12659 = vmatpush1.bf16.msra.mxu0 0
  %12660 = vmatprep.subr.bf16.mxu0 0
  %12661 = vmatpush1.bf16.msra.mxu0 0
  %12662 = vmatprep.subr.bf16.mxu0 0
  %12663 = vmatpush1.bf16.msra.mxu0 0
  %12664 = vmatprep.subr.bf16.mxu0 0
  %12665 = vmatpush1.bf16.msra.mxu0 0
  %12666 = vmatprep.subr.bf16.mxu0 0
  %12667 = vmatpush1.bf16.msra.mxu0 0
  %12668 = vmatprep.subr.bf16.mxu0 0
  %12669 = vmatpush1.bf16.msra.mxu0 0
  %12670 = vmatprep.subr.bf16.mxu0 0
  %12671 = vmatpush1.bf16.msra.mxu0 0
  %12672 = vmatprep.mubr.bf16.mxu0 0
  %12673 = vmatmul.mubr.bf16.gmra.mrb[0].mxu0 %v12532
  %v12674 = vpop.f32.mrb[0].mxu0
  %v12675 = vadd.f32 %v12529, %v12674
  %v12676 = vpop.f32.mrb[0].mxu0
  %v12677 = vadd.f32 %v12529, %v12676
  %v12678 = vpop.f32.mrb[0].mxu0
  %v12679 = vpop.f32.mrb[0].mxu0
  %12680 = vdwg.mxu0
  %12681 = vmatprep.subr.bf16.mxu0 %v12556
  %12682 = vmatpush1.bf16.msra.mxu0 %v12553
  %12683 = vmatprep.subr.bf16.mxu0 0
  %12684 = vmatpush1.bf16.msra.mxu0 0
  %12685 = vmatprep.subr.bf16.mxu0 0
  %12686 = vmatpush1.bf16.msra.mxu0 0
  %12687 = vmatprep.subr.bf16.mxu0 0
  %12688 = vmatpush1.bf16.msra.mxu0 0
  %12689 = vmatprep.subr.bf16.mxu0 0
  %12690 = vmatpush1.bf16.msra.mxu0 0
  %12691 = vmatprep.subr.bf16.mxu0 0
  %12692 = vmatpush1.bf16.msra.mxu0 0
  %12693 = vmatprep.subr.bf16.mxu0 0
  %12694 = vmatpush1.bf16.msra.mxu0 0
  %12695 = vmatprep.subr.bf16.mxu0 0
  %12696 = vmatpush1.bf16.msra.mxu0 0
  %12697 = vmatprep.subr.bf16.mxu0 0
  %12698 = vmatpush1.bf16.msra.mxu0 0
  %12699 = vmatprep.subr.bf16.mxu0 0
  %12700 = vmatpush1.bf16.msra.mxu0 0
  %12701 = vmatprep.subr.bf16.mxu0 0
  %12702 = vmatpush1.bf16.msra.mxu0 0
  %12703 = vmatprep.subr.bf16.mxu0 0
  %12704 = vmatpush1.bf16.msra.mxu0 0
  %12705 = vmatprep.subr.bf16.mxu0 0
  %12706 = vmatpush1.bf16.msra.mxu0 0
  %12707 = vmatprep.subr.bf16.mxu0 0
  %12708 = vmatpush1.bf16.msra.mxu0 0
  %12709 = vmatprep.subr.bf16.mxu0 0
  %12710 = vmatpush1.bf16.msra.mxu0 0
  %12711 = vmatprep.subr.bf16.mxu0 0
  %12712 = vmatpush1.bf16.msra.mxu0 0
  %12713 = vmatprep.mubr.bf16.mxu0 0
  %12714 = vmatmul.mubr.bf16.gmra.mrb[0].mxu0 %v12532
  %v12715 = vpop.f32.mrb[0].mxu0
  %v12716 = vadd.f32 %v12529, %v12715
  %v12717 = vpop.f32.mrb[0].mxu0
  %v12718 = vadd.f32 %v12529, %v12717
  %v12719 = vpop.f32.mrb[0].mxu0
  %v12720 = vpop.f32.mrb[0].mxu0
  %12721 = vdwg.mxu0
  %v12722 = vadd.f32 %v12593, %v34
  %v12723 = vadd.f32 %v12595, %v35
  %v12724 = vadd.f32 %v12634, %v36
  %v12725 = vadd.f32 %v12636, %v37
  %v12726 = vadd.f32 %v12675, %v38
  %v12727 = vadd.f32 %v12677, %v39
  %v12728 = vadd.f32 %v12716, %v40
  %v12729 = vadd.f32 %v12718, %v41
  %12730 = vst [vmem:[%s8] sm:$0xff] %v12722
  %12731 = vst [vmem:[%s8 + $0x8] sm:$0xff] %v12723
  %12732 = vst [vmem:[%s8 + $0x10] sm:$0xff] %v12724
  %12733 = vst [vmem:[%s8 + $0x18] sm:$0xff] %v12725
  %12734 = vst [vmem:[%s8 + $0x20] sm:$0xff] %v12726
  %12735 = vst [vmem:[%s8 + $0x28] sm:$0xff] %v12727
  %12736 = vst [vmem:[%s8 + $0x30] sm:$0xff] %v12728
  %12737 = vst [vmem:[%s8 + $0x38] sm:$0xff] %v12729
  // Predicated region
  $region34: #{resblock_pallas.1} parent=0 // pred_check
    _
  $region35: #{resblock_pallas.1} parent=0 // pred_check_branch
    %12739 = sbr.rel (0) target = $region37
  $region36: #{resblock_pallas.1} parent=0 // pred_region
    _
  $region37: #{resblock_pallas.1} parent=0 // pred_fallthru
    _
  // Predicated region
  $region38: #{resblock_pallas.1} parent=0 // pred_check
    _
  $region39: #{resblock_pallas.1} parent=0 // pred_check_branch
    %12741 = sbr.rel (0) target = $region41
  $region40: #{resblock_pallas.1} parent=0 // pred_region
    _
  $region41: #{resblock_pallas.1} parent=0 // pred_fallthru
    _

</llo_original>
